<compile_context>
chip_gen: v6e
topology: v6e:2x2x1
jax: 0.10.0
libtpu: 0.0.40
codegen_flags: <defaults>
</compile_context>

<pallas_src>
import jax
import jax.numpy as jnp
import numpy as np
from jax import lax
from jax.experimental import pallas as pl
from jax.experimental.pallas import tpu as pltpu

NUM_CLASS = 10


def _round_up(x, m):
    return (x + m - 1) // m * m


def _split_bf16(a):
    """Split an f32 array into bf16 hi + bf16 lo (a ~= hi + lo)."""
    hi = a.astype(jnp.bfloat16)
    lo = (a - hi.astype(jnp.float32)).astype(jnp.bfloat16)
    return hi, lo


def _dot3(a_f32, b_hi, b_lo):
    """~Precision.HIGH matmul: 3 single-pass bf16 MXU dots (drops the lo*lo term)."""
    a_hi, a_lo = _split_bf16(a_f32)
    acc = jnp.dot(a_hi, b_hi, preferred_element_type=jnp.float32)
    acc = acc + jnp.dot(a_lo, b_hi, preferred_element_type=jnp.float32)
    acc = acc + jnp.dot(a_hi, b_lo, preferred_element_type=jnp.float32)
    return acc


# ================================ the fused kernel ====================================
def fused_cnn_kernel(xe_ref, xo_ref, w1h_ref, w1l_ref, b1t_ref, w2h_ref, w2l_ref,
                     b2t_ref, wf1_ref, bf1_ref, wf2_ref, bf2_ref, wf3_ref, bf3_ref,
                     out_ref, q1_scr):
    f32 = jnp.float32
    B = xe_ref.shape[0] // 16            # images packed into this grid step

    # ---- conv1: kh folded into K -> one (24B, 288) @ (288, 768) MXU matmul ----------
    # xe_ref/xo_ref rows are laid out (image_row r, image i) -> r*B + i; xe holds the
    # even image rows (0,2,..,30), xo the odd ones.  A conv output row ho = 2*h2+parity
    # needs input rows ho+kh, which for every (parity, kh) is one contiguous 12B-row slab.
    es = [xe_ref[s * B:(s + 12) * B, :] for s in range(5)]      # (12B, 32) f32 slabs
    xs = [xo_ref[s * B:(s + 12) * B, :] for s in range(5)]
    even_parts = [es[kh // 2] if kh % 2 == 0 else xs[(kh - 1) // 2] for kh in range(9)]
    odd_parts = [xs[kh // 2] if kh % 2 == 0 else es[(kh + 1) // 2] for kh in range(9)]
    lhs1 = jnp.concatenate(
        [jnp.concatenate(even_parts, axis=1),                   # rows: even conv rows
         jnp.concatenate(odd_parts, axis=1)], axis=0)           # rows: odd conv rows
    a1 = _dot3(lhs1, w1h_ref[...], w1l_ref[...])                # (24B, 768)

    # H half of maxpool1 (even vs odd conv rows) + bias + ReLU (commute with max), then
    # W half of maxpool1: W1 columns are ordered [even-wo | odd-wo] (384 each, aligned).
    p1 = jnp.maximum(jnp.maximum(a1[:12 * B], a1[12 * B:]) + b1t_ref[...], 0.0)
    q1_scr[...] = jnp.maximum(p1[:, :384], p1[:, 384:])         # (12B, 384), col = w2*32+ci

    # ---- conv2: 9 kh taps, K = 384 each (no zero rows), register accumulation --------
    c2 = jnp.zeros((4 * B, 128), f32)
    for kh in range(9):                                          # static unroll
        lhs = q1_scr[kh * B:(kh + 4) * B, :]                     # (4B, 384)
        c2 = c2 + _dot3(lhs, w2h_ref[kh], w2l_ref[kh])
    c2 = jnp.maximum(c2 + b2t_ref[...], 0.0)                     # (4B, 128)

    # ---- maxpool2 (columns ordered [even-wo2 | odd-wo2]) + fc1 -> fc2 -> fc3 ----------
    gw = jnp.maximum(c2[:, :64], c2[:, 64:])                     # (4B, 64), col = w4*32+co
    f0 = jnp.maximum(gw[0:B], gw[B:2 * B])                       # pooled row h4 = 0
    f1 = jnp.maximum(gw[2 * B:3 * B], gw[3 * B:4 * B])           # pooled row h4 = 1
    hf = jnp.concatenate([f0, f1], axis=1)                       # (B, 128)

    hp = lax.Precision.HIGHEST                                   # fc's are tiny; keep exact
    h = jnp.dot(hf, wf1_ref[...], precision=hp, preferred_element_type=f32) + bf1_ref[...]
    h = jnp.dot(h, wf2_ref[...], precision=hp, preferred_element_type=f32) + bf2_ref[...]
    out_ref[...] = (jnp.dot(h, wf3_ref[...], precision=hp,
                            preferred_element_type=f32) + bf3_ref[...])


# ====================== weight re-packing (runs once, on parameters) ==================
def _build_w1(cnn1_w):
    # (32, 1, 9, 9) OIHW -> (288, 768):
    #   row  k = kh*32 + w_in
    #   col  j = blk*384 + we*32 + co        (conv output column wo = 2*we + blk)
    w1t = jnp.transpose(cnn1_w[:, 0, :, :], (1, 2, 0))            # (kh, kw, co)
    w_in = np.arange(32)[:, None, None]
    blk = np.arange(2)[None, :, None]
    we = np.arange(12)[None, None, :]
    kw = w_in - (2 * we + blk)                                    # (32, 2, 12)
    valid = (kw >= 0) & (kw < 9)
    mat = w1t[:, np.where(valid, kw, 0), :]                       # (9, 32, 2, 12, 32)
    mat = mat * jnp.asarray(valid, jnp.float32)[None, :, :, :, None]
    return mat.reshape(288, 768)


def _build_w2(cnn2_w):
    # (32, 32, 9, 9) OIHW -> (9, 384, 128):
    #   row  r = w2*32 + ci                  (pool1 output column w2 in [0,12))
    #   col  j = blk*64 + w4*32 + co         (conv2 output column wo2 = 2*w4 + blk)
    w2t = jnp.transpose(cnn2_w, (2, 3, 1, 0))                     # (kh, kw, ci, co)
    w2i = np.arange(12)[:, None, None]
    blk = np.arange(2)[None, :, None]
    w4 = np.arange(2)[None, None, :]
    kw = w2i - (2 * w4 + blk)                                     # (12, 2, 2)
    valid = (kw >= 0) & (kw < 9)
    mat = w2t[:, np.where(valid, kw, 0), :, :]                    # (9, 12, 2, 2, 32, 32)
    mat = mat * jnp.asarray(valid, jnp.float32)[None, :, :, :, None, None]
    mat = jnp.transpose(mat, (0, 1, 4, 2, 3, 5))                  # (kh, w2, ci, blk, w4, co)
    return mat.reshape(9, 384, 128)


def _build_wf1(fc1_w):
    # PyTorch flatten index of (c, h4, w4) is c*4 + h4*2 + w4; kernel feature index is
    # h4*64 + w4*32 + c.  Permute fc1_w.T rows accordingly.
    idx = np.zeros((128,), np.int32)
    for h4 in range(2):
        for w4 in range(2):
            for c in range(32):
                idx[h4 * 64 + w4 * 32 + c] = c * 4 + h4 * 2 + w4
    return fc1_w.T[idx, :]                                        # (128, 64)


# ==================================== wrapper =========================================
def cnn_model_forward(ts_nchw, p, block_b=32):
    # ts_nchw: (N, 1, 32, 32) float32, exactly the PyTorch input layout.
    n, c_in, h, w = ts_nchw.shape
    assert (c_in, h, w) == (1, 32, 32), "CNN_Model implies 1x32x32 inputs (fc1 = 128 feats)"

    b = _round_up(min(block_b, _round_up(n, 8)), 8)               # images per grid step
    n_pad = _round_up(n, b)
    n_blocks = n_pad // b

    x = ts_nchw[:, 0, :, :].astype(jnp.float32)
    if n_pad != n:
        x = jnp.pad(x, ((0, n_pad - n), (0, 0), (0, 0)))

    def to_blocked(xp):  # (n_pad, 16, 32) -> (n_blocks, 16*b, 32), rows = r*b + image
        return xp.reshape(n_blocks, b, 16, 32).transpose(0, 2, 1, 3).reshape(
            n_blocks, 16 * b, 32)

    xe = to_blocked(x[:, 0::2, :])                                # even image rows
    xo = to_blocked(x[:, 1::2, :])                                # odd image rows

    w1h, w1l = _split_bf16(_build_w1(p["cnn1_w"]))
    b1t = jnp.tile(p["cnn1_b"], 24).reshape(1, 768).astype(jnp.float32)
    w2h, w2l = _split_bf16(_build_w2(p["cnn2_w"]))
    b2t = jnp.tile(p["cnn2_b"], 4).reshape(1, 128).astype(jnp.float32)
    wf1 = _build_wf1(p["fc1_w"]).astype(jnp.float32)
    bf1 = p["fc1_b"].reshape(1, 64).astype(jnp.float32)
    wf2 = p["fc2_w"].T.astype(jnp.float32)
    bf2 = p["fc2_b"].reshape(1, 96).astype(jnp.float32)
    wf3 = p["fc3_w"].T.astype(jnp.float32)
    bf3 = p["fc3_b"].reshape(1, NUM_CLASS).astype(jnp.float32)
    weights = [w1h, w1l, b1t, w2h, w2l, b2t, wf1, bf1, wf2, bf2, wf3, bf3]

    img_spec = pl.BlockSpec((None, 16 * b, 32), lambda i: (i, 0, 0))

    def full_spec(arr):
        nd = arr.ndim
        return pl.BlockSpec(arr.shape, lambda i, _nd=nd: (0,) * _nd)

    out = pl.pallas_call(
        fused_cnn_kernel,
        out_shape=jax.ShapeDtypeStruct((n_pad, NUM_CLASS), jnp.float32),
        grid=(n_blocks,),
        in_specs=[img_spec, img_spec] + [full_spec(wgt) for wgt in weights],
        out_specs=pl.BlockSpec((b, NUM_CLASS), lambda i: (i, 0)),
        scratch_shapes=[pltpu.VMEM((12 * b, 384), jnp.float32)],  # pool1 output
        compiler_params=pltpu.CompilerParams(
            dimension_semantics=("parallel",),      # batch blocks shard across TCs (v7x)
            vmem_limit_bytes=48 * 1024 * 1024),
    )(xe, xo, *weights)
    return out[:n]


# ============================== parameters & reference ================================
def init_params(key):
    ks = jax.random.split(key, 10)

    def rnd(k, shape, scale=0.05):
        return scale * jax.random.normal(k, shape, jnp.float32)

    return {
        "cnn1_w": rnd(ks[0], (32, 1, 9, 9)),   # PyTorch OIHW
        "cnn1_b": rnd(ks[1], (32,)),
        "cnn2_w": rnd(ks[2], (32, 32, 9, 9)),
        "cnn2_b": rnd(ks[3], (32,)),
        "fc1_w": rnd(ks[4], (64, 128)),        # PyTorch (out, in)
        "fc1_b": rnd(ks[5], (64,)),
        "fc2_w": rnd(ks[6], (96, 64)),
        "fc2_b": rnd(ks[7], (96,)),
        "fc3_w": rnd(ks[8], (10, 96)),
        "fc3_b": rnd(ks[9], (10,)),
    }


def reference_forward(ts_nchw, p):
    # Pure-JAX replica of the PyTorch forward (NCHW throughout), for verification.
    prec = lax.Precision.HIGHEST

    def conv(x, w, b):
        y = lax.conv_general_dilated(x, w, (1, 1), "VALID",
                                     dimension_numbers=("NCHW", "OIHW", "NCHW"),
                                     precision=prec)
        return jnp.maximum(y + b[None, :, None, None], 0.0)

    def pool(x):
        n, c, h, w = x.shape
        return x.reshape(n, c, h // 2, 2, w // 2, 2).max(axis=(3, 5))

    y = pool(conv(ts_nchw, p["cnn1_w"], p["cnn1_b"]))
    y = pool(conv(y, p["cnn2_w"], p["cnn2_b"]))
    y = y.reshape(y.shape[0], -1)
    y = jnp.dot(y, p["fc1_w"].T, precision=prec) + p["fc1_b"]
    y = jnp.dot(y, p["fc2_w"].T, precision=prec) + p["fc2_b"]
    return jnp.dot(y, p["fc3_w"].T, precision=prec) + p["fc3_b"]


if __name__ == "__main__":
    key = jax.random.PRNGKey(0)
    k_x, k_p = jax.random.split(key)
    params = init_params(k_p)

    fwd = jax.jit(cnn_model_forward)
    ref = jax.jit(reference_forward)

    # fc1 expects 128 = 32*2*2 features => single-channel 32x32 inputs.
    ts_small = jax.random.normal(k_x, (2, 1, 32, 32), jnp.float32)
    out_small = jax.block_until_ready(fwd(ts_small, params))
    ref_small = jax.block_until_ready(ref(ts_small, params))
    assert out_small.shape == (2, NUM_CLASS), out_small.shape
    np.testing.assert_allclose(np.asarray(out_small), np.asarray(ref_small),
                               rtol=2e-3, atol=2e-3)

    # Larger, non-multiple batch: exercises batch blocking (B=32), padding and grid > 1.
    ts_big = jax.random.normal(k_x, (50, 1, 32, 32), jnp.float32)
    out_big = jax.block_until_ready(fwd(ts_big, params))
    ref_big = jax.block_until_ready(ref(ts_big, params))
    assert out_big.shape == (50, NUM_CLASS), out_big.shape
    np.testing.assert_allclose(np.asarray(out_big), np.asarray(ref_big),
                               rtol=2e-3, atol=2e-3)

    print("KERNEL_OK")
</pallas_src>

<mosaic_0001>
module attributes {stable_mosaic.version = 11 : i64} {
  func.func @fused_cnn_kernel(%arg0: i32, %arg1: memref<1x128x32xf32, #tpu.memory_space<vmem>>, %arg2: memref<1x128x32xf32, #tpu.memory_space<vmem>>, %arg3: memref<288x768xbf16, #tpu.memory_space<vmem>>, %arg4: memref<288x768xbf16, #tpu.memory_space<vmem>>, %arg5: memref<1x768xf32, #tpu.memory_space<vmem>>, %arg6: memref<9x384x128xbf16, #tpu.memory_space<vmem>>, %arg7: memref<9x384x128xbf16, #tpu.memory_space<vmem>>, %arg8: memref<1x128xf32, #tpu.memory_space<vmem>>, %arg9: memref<128x64xf32, #tpu.memory_space<vmem>>, %arg10: memref<1x64xf32, #tpu.memory_space<vmem>>, %arg11: memref<64x96xf32, #tpu.memory_space<vmem>>, %arg12: memref<1x96xf32, #tpu.memory_space<vmem>>, %arg13: memref<96x10xf32, #tpu.memory_space<vmem>>, %arg14: memref<1x10xf32, #tpu.memory_space<vmem>>, %arg15: memref<8x10xf32, #tpu.memory_space<vmem>>, %arg16: memref<96x384xf32, #tpu.memory_space<vmem>>) attributes {dimension_semantics = [#tpu.dimension_semantics<parallel>], iteration_bounds = array<i64: 1>, scalar_prefetch = 0 : i64, scratch_operands = 1 : i64, tpu.core_type = #tpu.core_type<tc>, window_params = [{transform_indices = @transform_0, window_bounds = array<i64: 1, 128, 32>}, {transform_indices = @transform_1, window_bounds = array<i64: 1, 128, 32>}, {pipeline_mode = #tpu.pipeline_mode<synchronous>, transform_indices = @transform_2, window_bounds = array<i64: 288, 768>}, {pipeline_mode = #tpu.pipeline_mode<synchronous>, transform_indices = @transform_3, window_bounds = array<i64: 288, 768>}, {pipeline_mode = #tpu.pipeline_mode<synchronous>, transform_indices = @transform_4, window_bounds = array<i64: 1, 768>}, {pipeline_mode = #tpu.pipeline_mode<synchronous>, transform_indices = @transform_5, window_bounds = array<i64: 9, 384, 128>}, {pipeline_mode = #tpu.pipeline_mode<synchronous>, transform_indices = @transform_6, window_bounds = array<i64: 9, 384, 128>}, {pipeline_mode = #tpu.pipeline_mode<synchronous>, transform_indices = @transform_7, window_bounds = array<i64: 1, 128>}, {pipeline_mode = #tpu.pipeline_mode<synchronous>, transform_indices = @transform_8, window_bounds = array<i64: 128, 64>}, {pipeline_mode = #tpu.pipeline_mode<synchronous>, transform_indices = @transform_9, window_bounds = array<i64: 1, 64>}, {pipeline_mode = #tpu.pipeline_mode<synchronous>, transform_indices = @transform_10, window_bounds = array<i64: 64, 96>}, {pipeline_mode = #tpu.pipeline_mode<synchronous>, transform_indices = @transform_11, window_bounds = array<i64: 1, 96>}, {pipeline_mode = #tpu.pipeline_mode<synchronous>, transform_indices = @transform_12, window_bounds = array<i64: 96, 10>}, {pipeline_mode = #tpu.pipeline_mode<synchronous>, transform_indices = @transform_13, window_bounds = array<i64: 1, 10>}, {transform_indices = @transform_14, window_bounds = array<i64: 8, 10>}]} {
    %c0 = arith.constant 0 : index
    %c0_0 = arith.constant 0 : index
    %c0_1 = arith.constant 0 : index
    %0 = vector.load %arg1[%c0, %c0_0, %c0_1] : memref<1x128x32xf32, #tpu.memory_space<vmem>>, vector<1x96x32xf32>
    %1 = vector.shape_cast %0 : vector<1x96x32xf32> to vector<96x32xf32>
    %c0_2 = arith.constant 0 : index
    %c8 = arith.constant 8 : index
    %c0_3 = arith.constant 0 : index
    %2 = vector.load %arg1[%c0_2, %c8, %c0_3] : memref<1x128x32xf32, #tpu.memory_space<vmem>>, vector<1x96x32xf32>
    %3 = vector.shape_cast %2 : vector<1x96x32xf32> to vector<96x32xf32>
    %c0_4 = arith.constant 0 : index
    %c16 = arith.constant 16 : index
    %c0_5 = arith.constant 0 : index
    %4 = vector.load %arg1[%c0_4, %c16, %c0_5] : memref<1x128x32xf32, #tpu.memory_space<vmem>>, vector<1x96x32xf32>
    %5 = vector.shape_cast %4 : vector<1x96x32xf32> to vector<96x32xf32>
    %c0_6 = arith.constant 0 : index
    %c24 = arith.constant 24 : index
    %c0_7 = arith.constant 0 : index
    %6 = vector.load %arg1[%c0_6, %c24, %c0_7] : memref<1x128x32xf32, #tpu.memory_space<vmem>>, vector<1x96x32xf32>
    %7 = vector.shape_cast %6 : vector<1x96x32xf32> to vector<96x32xf32>
    %c0_8 = arith.constant 0 : index
    %c32 = arith.constant 32 : index
    %c0_9 = arith.constant 0 : index
    %8 = vector.load %arg1[%c0_8, %c32, %c0_9] : memref<1x128x32xf32, #tpu.memory_space<vmem>>, vector<1x96x32xf32>
    %9 = vector.shape_cast %8 : vector<1x96x32xf32> to vector<96x32xf32>
    %c0_10 = arith.constant 0 : index
    %c0_11 = arith.constant 0 : index
    %c0_12 = arith.constant 0 : index
    %10 = vector.load %arg2[%c0_10, %c0_11, %c0_12] : memref<1x128x32xf32, #tpu.memory_space<vmem>>, vector<1x96x32xf32>
    %11 = vector.shape_cast %10 : vector<1x96x32xf32> to vector<96x32xf32>
    %c0_13 = arith.constant 0 : index
    %c8_14 = arith.constant 8 : index
    %c0_15 = arith.constant 0 : index
    %12 = vector.load %arg2[%c0_13, %c8_14, %c0_15] : memref<1x128x32xf32, #tpu.memory_space<vmem>>, vector<1x96x32xf32>
    %13 = vector.shape_cast %12 : vector<1x96x32xf32> to vector<96x32xf32>
    %c0_16 = arith.constant 0 : index
    %c16_17 = arith.constant 16 : index
    %c0_18 = arith.constant 0 : index
    %14 = vector.load %arg2[%c0_16, %c16_17, %c0_18] : memref<1x128x32xf32, #tpu.memory_space<vmem>>, vector<1x96x32xf32>
    %15 = vector.shape_cast %14 : vector<1x96x32xf32> to vector<96x32xf32>
    %c0_19 = arith.constant 0 : index
    %c24_20 = arith.constant 24 : index
    %c0_21 = arith.constant 0 : index
    %16 = vector.load %arg2[%c0_19, %c24_20, %c0_21] : memref<1x128x32xf32, #tpu.memory_space<vmem>>, vector<1x96x32xf32>
    %17 = vector.shape_cast %16 : vector<1x96x32xf32> to vector<96x32xf32>
    %c0_22 = arith.constant 0 : index
    %c32_23 = arith.constant 32 : index
    %c0_24 = arith.constant 0 : index
    %18 = vector.load %arg2[%c0_22, %c32_23, %c0_24] : memref<1x128x32xf32, #tpu.memory_space<vmem>>, vector<1x96x32xf32>
    %19 = vector.shape_cast %18 : vector<1x96x32xf32> to vector<96x32xf32>
    %20 = tpu.concatenate %1, %11, %3, %13, %5, %15, %7, %17, %9 in 1 : vector<96x32xf32>, vector<96x32xf32>, vector<96x32xf32>, vector<96x32xf32>, vector<96x32xf32>, vector<96x32xf32>, vector<96x32xf32>, vector<96x32xf32>, vector<96x32xf32> -> vector<96x288xf32>
    %21 = tpu.concatenate %11, %3, %13, %5, %15, %7, %17, %9, %19 in 1 : vector<96x32xf32>, vector<96x32xf32>, vector<96x32xf32>, vector<96x32xf32>, vector<96x32xf32>, vector<96x32xf32>, vector<96x32xf32>, vector<96x32xf32>, vector<96x32xf32> -> vector<96x288xf32>
    %22 = tpu.concatenate %20, %21 in 0 : vector<96x288xf32>, vector<96x288xf32> -> vector<192x288xf32>
    %c0_25 = arith.constant 0 : index
    %c0_26 = arith.constant 0 : index
    %23 = vector.load %arg3[%c0_25, %c0_26] : memref<288x768xbf16, #tpu.memory_space<vmem>>, vector<288x768xbf16>
    %c0_27 = arith.constant 0 : index
    %c0_28 = arith.constant 0 : index
    %24 = vector.load %arg4[%c0_27, %c0_28] : memref<288x768xbf16, #tpu.memory_space<vmem>>, vector<288x768xbf16>
    %25 = arith.truncf %22 : vector<192x288xf32> to vector<192x288xbf16>
    %26 = arith.extf %25 : vector<192x288xbf16> to vector<192x288xf32>
    %27 = arith.subf %22, %26 : vector<192x288xf32>
    %28 = arith.truncf %27 : vector<192x288xf32> to vector<192x288xbf16>
    %cst = arith.constant dense<0.000000e+00> : vector<192x768xf32>
    %29 = tpu.matmul %25, %23, %cst {dimension_numbers = #tpu.dot_dimension_numbers<[1], [0], [0], [1], [0, 0, 1, 1], [], []>} : vector<192x288xbf16>, vector<288x768xbf16>, vector<192x768xf32> -> vector<192x768xf32>
    %cst_29 = arith.constant dense<0.000000e+00> : vector<192x768xf32>
    %30 = tpu.matmul %28, %23, %cst_29 {dimension_numbers = #tpu.dot_dimension_numbers<[1], [0], [0], [1], [0, 0, 1, 1], [], []>} : vector<192x288xbf16>, vector<288x768xbf16>, vector<192x768xf32> -> vector<192x768xf32>
    %31 = arith.addf %29, %30 : vector<192x768xf32>
    %cst_30 = arith.constant dense<0.000000e+00> : vector<192x768xf32>
    %32 = tpu.matmul %25, %24, %cst_30 {dimension_numbers = #tpu.dot_dimension_numbers<[1], [0], [0], [1], [0, 0, 1, 1], [], []>} : vector<192x288xbf16>, vector<288x768xbf16>, vector<192x768xf32> -> vector<192x768xf32>
    %33 = arith.addf %31, %32 : vector<192x768xf32>
    %34 = vector.extract_strided_slice %33 {offsets = [0, 0], sizes = [96, 768], strides = [1, 1]} : vector<192x768xf32> to vector<96x768xf32>
    %35 = vector.extract_strided_slice %33 {offsets = [96, 0], sizes = [96, 768], strides = [1, 1]} : vector<192x768xf32> to vector<96x768xf32>
    %36 = arith.maximumf %34, %35 : vector<96x768xf32>
    %c0_31 = arith.constant 0 : index
    %c0_32 = arith.constant 0 : index
    %37 = vector.load %arg5[%c0_31, %c0_32] : memref<1x768xf32, #tpu.memory_space<vmem>>, vector<1x768xf32>
    %38 = vector.broadcast %37 : vector<1x768xf32> to vector<96x768xf32>
    %39 = arith.addf %36, %38 : vector<96x768xf32>
    %cst_33 = arith.constant 0.000000e+00 : f32
    %40 = vector.broadcast %cst_33 : f32 to vector<96x768xf32>
    %41 = arith.maximumf %39, %40 : vector<96x768xf32>
    %42 = vector.extract_strided_slice %41 {offsets = [0, 0], sizes = [96, 384], strides = [1, 1]} : vector<96x768xf32> to vector<96x384xf32>
    %43 = vector.extract_strided_slice %41 {offsets = [0, 384], sizes = [96, 384], strides = [1, 1]} : vector<96x768xf32> to vector<96x384xf32>
    %44 = arith.maximumf %42, %43 : vector<96x384xf32>
    %c0_34 = arith.constant 0 : index
    %c0_35 = arith.constant 0 : index
    %45 = vector.load %arg16[%c0_34, %c0_35] : memref<96x384xf32, #tpu.memory_space<vmem>>, vector<96x384xf32>
    tpu.vector_store %arg16[%c0_34, %c0_35], %44 {strides = array<i32>} : memref<96x384xf32, #tpu.memory_space<vmem>>, vector<96x384xf32>,
    %cst_36 = arith.constant 0.000000e+00 : f32
    %46 = vector.broadcast %cst_36 : f32 to vector<32x128xf32>
    %c0_37 = arith.constant 0 : index
    %c0_38 = arith.constant 0 : index
    %47 = vector.load %arg16[%c0_37, %c0_38] : memref<96x384xf32, #tpu.memory_space<vmem>>, vector<32x384xf32>
    %c0_39 = arith.constant 0 : index
    %c0_40 = arith.constant 0 : index
    %c0_41 = arith.constant 0 : index
    %48 = vector.load %arg6[%c0_39, %c0_40, %c0_41] : memref<9x384x128xbf16, #tpu.memory_space<vmem>>, vector<1x384x128xbf16>
    %49 = vector.shape_cast %48 : vector<1x384x128xbf16> to vector<384x128xbf16>
    %c0_42 = arith.constant 0 : index
    %c0_43 = arith.constant 0 : index
    %c0_44 = arith.constant 0 : index
    %50 = vector.load %arg7[%c0_42, %c0_43, %c0_44] : memref<9x384x128xbf16, #tpu.memory_space<vmem>>, vector<1x384x128xbf16>
    %51 = vector.shape_cast %50 : vector<1x384x128xbf16> to vector<384x128xbf16>
    %52 = arith.truncf %47 : vector<32x384xf32> to vector<32x384xbf16>
    %53 = arith.extf %52 : vector<32x384xbf16> to vector<32x384xf32>
    %54 = arith.subf %47, %53 : vector<32x384xf32>
    %55 = arith.truncf %54 : vector<32x384xf32> to vector<32x384xbf16>
    %cst_45 = arith.constant dense<0.000000e+00> : vector<32x128xf32>
    %56 = tpu.matmul %52, %49, %cst_45 {dimension_numbers = #tpu.dot_dimension_numbers<[1], [0], [0], [1], [0, 0, 1, 1], [], []>} : vector<32x384xbf16>, vector<384x128xbf16>, vector<32x128xf32> -> vector<32x128xf32>
    %cst_46 = arith.constant dense<0.000000e+00> : vector<32x128xf32>
    %57 = tpu.matmul %55, %49, %cst_46 {dimension_numbers = #tpu.dot_dimension_numbers<[1], [0], [0], [1], [0, 0, 1, 1], [], []>} : vector<32x384xbf16>, vector<384x128xbf16>, vector<32x128xf32> -> vector<32x128xf32>
    %58 = arith.addf %56, %57 : vector<32x128xf32>
    %cst_47 = arith.constant dense<0.000000e+00> : vector<32x128xf32>
    %59 = tpu.matmul %52, %51, %cst_47 {dimension_numbers = #tpu.dot_dimension_numbers<[1], [0], [0], [1], [0, 0, 1, 1], [], []>} : vector<32x384xbf16>, vector<384x128xbf16>, vector<32x128xf32> -> vector<32x128xf32>
    %60 = arith.addf %58, %59 : vector<32x128xf32>
    %61 = arith.addf %46, %60 : vector<32x128xf32>
    %c8_48 = arith.constant 8 : index
    %c0_49 = arith.constant 0 : index
    %62 = vector.load %arg16[%c8_48, %c0_49] : memref<96x384xf32, #tpu.memory_space<vmem>>, vector<32x384xf32>
    %c1 = arith.constant 1 : index
    %c0_50 = arith.constant 0 : index
    %c0_51 = arith.constant 0 : index
    %63 = vector.load %arg6[%c1, %c0_50, %c0_51] : memref<9x384x128xbf16, #tpu.memory_space<vmem>>, vector<1x384x128xbf16>
    %64 = vector.shape_cast %63 : vector<1x384x128xbf16> to vector<384x128xbf16>
    %c1_52 = arith.constant 1 : index
    %c0_53 = arith.constant 0 : index
    %c0_54 = arith.constant 0 : index
    %65 = vector.load %arg7[%c1_52, %c0_53, %c0_54] : memref<9x384x128xbf16, #tpu.memory_space<vmem>>, vector<1x384x128xbf16>
    %66 = vector.shape_cast %65 : vector<1x384x128xbf16> to vector<384x128xbf16>
    %67 = arith.truncf %62 : vector<32x384xf32> to vector<32x384xbf16>
    %68 = arith.extf %67 : vector<32x384xbf16> to vector<32x384xf32>
    %69 = arith.subf %62, %68 : vector<32x384xf32>
    %70 = arith.truncf %69 : vector<32x384xf32> to vector<32x384xbf16>
    %cst_55 = arith.constant dense<0.000000e+00> : vector<32x128xf32>
    %71 = tpu.matmul %67, %64, %cst_55 {dimension_numbers = #tpu.dot_dimension_numbers<[1], [0], [0], [1], [0, 0, 1, 1], [], []>} : vector<32x384xbf16>, vector<384x128xbf16>, vector<32x128xf32> -> vector<32x128xf32>
    %cst_56 = arith.constant dense<0.000000e+00> : vector<32x128xf32>
    %72 = tpu.matmul %70, %64, %cst_56 {dimension_numbers = #tpu.dot_dimension_numbers<[1], [0], [0], [1], [0, 0, 1, 1], [], []>} : vector<32x384xbf16>, vector<384x128xbf16>, vector<32x128xf32> -> vector<32x128xf32>
    %73 = arith.addf %71, %72 : vector<32x128xf32>
    %cst_57 = arith.constant dense<0.000000e+00> : vector<32x128xf32>
    %74 = tpu.matmul %67, %66, %cst_57 {dimension_numbers = #tpu.dot_dimension_numbers<[1], [0], [0], [1], [0, 0, 1, 1], [], []>} : vector<32x384xbf16>, vector<384x128xbf16>, vector<32x128xf32> -> vector<32x128xf32>
    %75 = arith.addf %73, %74 : vector<32x128xf32>
    %76 = arith.addf %61, %75 : vector<32x128xf32>
    %c16_58 = arith.constant 16 : index
    %c0_59 = arith.constant 0 : index
    %77 = vector.load %arg16[%c16_58, %c0_59] : memref<96x384xf32, #tpu.memory_space<vmem>>, vector<32x384xf32>
    %c2 = arith.constant 2 : index
    %c0_60 = arith.constant 0 : index
    %c0_61 = arith.constant 0 : index
    %78 = vector.load %arg6[%c2, %c0_60, %c0_61] : memref<9x384x128xbf16, #tpu.memory_space<vmem>>, vector<1x384x128xbf16>
    %79 = vector.shape_cast %78 : vector<1x384x128xbf16> to vector<384x128xbf16>
    %c2_62 = arith.constant 2 : index
    %c0_63 = arith.constant 0 : index
    %c0_64 = arith.constant 0 : index
    %80 = vector.load %arg7[%c2_62, %c0_63, %c0_64] : memref<9x384x128xbf16, #tpu.memory_space<vmem>>, vector<1x384x128xbf16>
    %81 = vector.shape_cast %80 : vector<1x384x128xbf16> to vector<384x128xbf16>
    %82 = arith.truncf %77 : vector<32x384xf32> to vector<32x384xbf16>
    %83 = arith.extf %82 : vector<32x384xbf16> to vector<32x384xf32>
    %84 = arith.subf %77, %83 : vector<32x384xf32>
    %85 = arith.truncf %84 : vector<32x384xf32> to vector<32x384xbf16>
    %cst_65 = arith.constant dense<0.000000e+00> : vector<32x128xf32>
    %86 = tpu.matmul %82, %79, %cst_65 {dimension_numbers = #tpu.dot_dimension_numbers<[1], [0], [0], [1], [0, 0, 1, 1], [], []>} : vector<32x384xbf16>, vector<384x128xbf16>, vector<32x128xf32> -> vector<32x128xf32>
    %cst_66 = arith.constant dense<0.000000e+00> : vector<32x128xf32>
    %87 = tpu.matmul %85, %79, %cst_66 {dimension_numbers = #tpu.dot_dimension_numbers<[1], [0], [0], [1], [0, 0, 1, 1], [], []>} : vector<32x384xbf16>, vector<384x128xbf16>, vector<32x128xf32> -> vector<32x128xf32>
    %88 = arith.addf %86, %87 : vector<32x128xf32>
    %cst_67 = arith.constant dense<0.000000e+00> : vector<32x128xf32>
    %89 = tpu.matmul %82, %81, %cst_67 {dimension_numbers = #tpu.dot_dimension_numbers<[1], [0], [0], [1], [0, 0, 1, 1], [], []>} : vector<32x384xbf16>, vector<384x128xbf16>, vector<32x128xf32> -> vector<32x128xf32>
    %90 = arith.addf %88, %89 : vector<32x128xf32>
    %91 = arith.addf %76, %90 : vector<32x128xf32>
    %c24_68 = arith.constant 24 : index
    %c0_69 = arith.constant 0 : index
    %92 = vector.load %arg16[%c24_68, %c0_69] : memref<96x384xf32, #tpu.memory_space<vmem>>, vector<32x384xf32>
    %c3 = arith.constant 3 : index
    %c0_70 = arith.constant 0 : index
    %c0_71 = arith.constant 0 : index
    %93 = vector.load %arg6[%c3, %c0_70, %c0_71] : memref<9x384x128xbf16, #tpu.memory_space<vmem>>, vector<1x384x128xbf16>
    %94 = vector.shape_cast %93 : vector<1x384x128xbf16> to vector<384x128xbf16>
    %c3_72 = arith.constant 3 : index
    %c0_73 = arith.constant 0 : index
    %c0_74 = arith.constant 0 : index
    %95 = vector.load %arg7[%c3_72, %c0_73, %c0_74] : memref<9x384x128xbf16, #tpu.memory_space<vmem>>, vector<1x384x128xbf16>
    %96 = vector.shape_cast %95 : vector<1x384x128xbf16> to vector<384x128xbf16>
    %97 = arith.truncf %92 : vector<32x384xf32> to vector<32x384xbf16>
    %98 = arith.extf %97 : vector<32x384xbf16> to vector<32x384xf32>
    %99 = arith.subf %92, %98 : vector<32x384xf32>
    %100 = arith.truncf %99 : vector<32x384xf32> to vector<32x384xbf16>
    %cst_75 = arith.constant dense<0.000000e+00> : vector<32x128xf32>
    %101 = tpu.matmul %97, %94, %cst_75 {dimension_numbers = #tpu.dot_dimension_numbers<[1], [0], [0], [1], [0, 0, 1, 1], [], []>} : vector<32x384xbf16>, vector<384x128xbf16>, vector<32x128xf32> -> vector<32x128xf32>
    %cst_76 = arith.constant dense<0.000000e+00> : vector<32x128xf32>
    %102 = tpu.matmul %100, %94, %cst_76 {dimension_numbers = #tpu.dot_dimension_numbers<[1], [0], [0], [1], [0, 0, 1, 1], [], []>} : vector<32x384xbf16>, vector<384x128xbf16>, vector<32x128xf32> -> vector<32x128xf32>
    %103 = arith.addf %101, %102 : vector<32x128xf32>
    %cst_77 = arith.constant dense<0.000000e+00> : vector<32x128xf32>
    %104 = tpu.matmul %97, %96, %cst_77 {dimension_numbers = #tpu.dot_dimension_numbers<[1], [0], [0], [1], [0, 0, 1, 1], [], []>} : vector<32x384xbf16>, vector<384x128xbf16>, vector<32x128xf32> -> vector<32x128xf32>
    %105 = arith.addf %103, %104 : vector<32x128xf32>
    %106 = arith.addf %91, %105 : vector<32x128xf32>
    %c32_78 = arith.constant 32 : index
    %c0_79 = arith.constant 0 : index
    %107 = vector.load %arg16[%c32_78, %c0_79] : memref<96x384xf32, #tpu.memory_space<vmem>>, vector<32x384xf32>
    %c4 = arith.constant 4 : index
    %c0_80 = arith.constant 0 : index
    %c0_81 = arith.constant 0 : index
    %108 = vector.load %arg6[%c4, %c0_80, %c0_81] : memref<9x384x128xbf16, #tpu.memory_space<vmem>>, vector<1x384x128xbf16>
    %109 = vector.shape_cast %108 : vector<1x384x128xbf16> to vector<384x128xbf16>
    %c4_82 = arith.constant 4 : index
    %c0_83 = arith.constant 0 : index
    %c0_84 = arith.constant 0 : index
    %110 = vector.load %arg7[%c4_82, %c0_83, %c0_84] : memref<9x384x128xbf16, #tpu.memory_space<vmem>>, vector<1x384x128xbf16>
    %111 = vector.shape_cast %110 : vector<1x384x128xbf16> to vector<384x128xbf16>
    %112 = arith.truncf %107 : vector<32x384xf32> to vector<32x384xbf16>
    %113 = arith.extf %112 : vector<32x384xbf16> to vector<32x384xf32>
    %114 = arith.subf %107, %113 : vector<32x384xf32>
    %115 = arith.truncf %114 : vector<32x384xf32> to vector<32x384xbf16>
    %cst_85 = arith.constant dense<0.000000e+00> : vector<32x128xf32>
    %116 = tpu.matmul %112, %109, %cst_85 {dimension_numbers = #tpu.dot_dimension_numbers<[1], [0], [0], [1], [0, 0, 1, 1], [], []>} : vector<32x384xbf16>, vector<384x128xbf16>, vector<32x128xf32> -> vector<32x128xf32>
    %cst_86 = arith.constant dense<0.000000e+00> : vector<32x128xf32>
    %117 = tpu.matmul %115, %109, %cst_86 {dimension_numbers = #tpu.dot_dimension_numbers<[1], [0], [0], [1], [0, 0, 1, 1], [], []>} : vector<32x384xbf16>, vector<384x128xbf16>, vector<32x128xf32> -> vector<32x128xf32>
    %118 = arith.addf %116, %117 : vector<32x128xf32>
    %cst_87 = arith.constant dense<0.000000e+00> : vector<32x128xf32>
    %119 = tpu.matmul %112, %111, %cst_87 {dimension_numbers = #tpu.dot_dimension_numbers<[1], [0], [0], [1], [0, 0, 1, 1], [], []>} : vector<32x384xbf16>, vector<384x128xbf16>, vector<32x128xf32> -> vector<32x128xf32>
    %120 = arith.addf %118, %119 : vector<32x128xf32>
    %121 = arith.addf %106, %120 : vector<32x128xf32>
    %c40 = arith.constant 40 : index
    %c0_88 = arith.constant 0 : index
    %122 = vector.load %arg16[%c40, %c0_88] : memref<96x384xf32, #tpu.memory_space<vmem>>, vector<32x384xf32>
    %c5 = arith.constant 5 : index
    %c0_89 = arith.constant 0 : index
    %c0_90 = arith.constant 0 : index
    %123 = vector.load %arg6[%c5, %c0_89, %c0_90] : memref<9x384x128xbf16, #tpu.memory_space<vmem>>, vector<1x384x128xbf16>
    %124 = vector.shape_cast %123 : vector<1x384x128xbf16> to vector<384x128xbf16>
    %c5_91 = arith.constant 5 : index
    %c0_92 = arith.constant 0 : index
    %c0_93 = arith.constant 0 : index
    %125 = vector.load %arg7[%c5_91, %c0_92, %c0_93] : memref<9x384x128xbf16, #tpu.memory_space<vmem>>, vector<1x384x128xbf16>
    %126 = vector.shape_cast %125 : vector<1x384x128xbf16> to vector<384x128xbf16>
    %127 = arith.truncf %122 : vector<32x384xf32> to vector<32x384xbf16>
    %128 = arith.extf %127 : vector<32x384xbf16> to vector<32x384xf32>
    %129 = arith.subf %122, %128 : vector<32x384xf32>
    %130 = arith.truncf %129 : vector<32x384xf32> to vector<32x384xbf16>
    %cst_94 = arith.constant dense<0.000000e+00> : vector<32x128xf32>
    %131 = tpu.matmul %127, %124, %cst_94 {dimension_numbers = #tpu.dot_dimension_numbers<[1], [0], [0], [1], [0, 0, 1, 1], [], []>} : vector<32x384xbf16>, vector<384x128xbf16>, vector<32x128xf32> -> vector<32x128xf32>
    %cst_95 = arith.constant dense<0.000000e+00> : vector<32x128xf32>
    %132 = tpu.matmul %130, %124, %cst_95 {dimension_numbers = #tpu.dot_dimension_numbers<[1], [0], [0], [1], [0, 0, 1, 1], [], []>} : vector<32x384xbf16>, vector<384x128xbf16>, vector<32x128xf32> -> vector<32x128xf32>
    %133 = arith.addf %131, %132 : vector<32x128xf32>
    %cst_96 = arith.constant dense<0.000000e+00> : vector<32x128xf32>
    %134 = tpu.matmul %127, %126, %cst_96 {dimension_numbers = #tpu.dot_dimension_numbers<[1], [0], [0], [1], [0, 0, 1, 1], [], []>} : vector<32x384xbf16>, vector<384x128xbf16>, vector<32x128xf32> -> vector<32x128xf32>
    %135 = arith.addf %133, %134 : vector<32x128xf32>
    %136 = arith.addf %121, %135 : vector<32x128xf32>
    %c48 = arith.constant 48 : index
    %c0_97 = arith.constant 0 : index
    %137 = vector.load %arg16[%c48, %c0_97] : memref<96x384xf32, #tpu.memory_space<vmem>>, vector<32x384xf32>
    %c6 = arith.constant 6 : index
    %c0_98 = arith.constant 0 : index
    %c0_99 = arith.constant 0 : index
    %138 = vector.load %arg6[%c6, %c0_98, %c0_99] : memref<9x384x128xbf16, #tpu.memory_space<vmem>>, vector<1x384x128xbf16>
    %139 = vector.shape_cast %138 : vector<1x384x128xbf16> to vector<384x128xbf16>
    %c6_100 = arith.constant 6 : index
    %c0_101 = arith.constant 0 : index
    %c0_102 = arith.constant 0 : index
    %140 = vector.load %arg7[%c6_100, %c0_101, %c0_102] : memref<9x384x128xbf16, #tpu.memory_space<vmem>>, vector<1x384x128xbf16>
    %141 = vector.shape_cast %140 : vector<1x384x128xbf16> to vector<384x128xbf16>
    %142 = arith.truncf %137 : vector<32x384xf32> to vector<32x384xbf16>
    %143 = arith.extf %142 : vector<32x384xbf16> to vector<32x384xf32>
    %144 = arith.subf %137, %143 : vector<32x384xf32>
    %145 = arith.truncf %144 : vector<32x384xf32> to vector<32x384xbf16>
    %cst_103 = arith.constant dense<0.000000e+00> : vector<32x128xf32>
    %146 = tpu.matmul %142, %139, %cst_103 {dimension_numbers = #tpu.dot_dimension_numbers<[1], [0], [0], [1], [0, 0, 1, 1], [], []>} : vector<32x384xbf16>, vector<384x128xbf16>, vector<32x128xf32> -> vector<32x128xf32>
    %cst_104 = arith.constant dense<0.000000e+00> : vector<32x128xf32>
    %147 = tpu.matmul %145, %139, %cst_104 {dimension_numbers = #tpu.dot_dimension_numbers<[1], [0], [0], [1], [0, 0, 1, 1], [], []>} : vector<32x384xbf16>, vector<384x128xbf16>, vector<32x128xf32> -> vector<32x128xf32>
    %148 = arith.addf %146, %147 : vector<32x128xf32>
    %cst_105 = arith.constant dense<0.000000e+00> : vector<32x128xf32>
    %149 = tpu.matmul %142, %141, %cst_105 {dimension_numbers = #tpu.dot_dimension_numbers<[1], [0], [0], [1], [0, 0, 1, 1], [], []>} : vector<32x384xbf16>, vector<384x128xbf16>, vector<32x128xf32> -> vector<32x128xf32>
    %150 = arith.addf %148, %149 : vector<32x128xf32>
    %151 = arith.addf %136, %150 : vector<32x128xf32>
    %c56 = arith.constant 56 : index
    %c0_106 = arith.constant 0 : index
    %152 = vector.load %arg16[%c56, %c0_106] : memref<96x384xf32, #tpu.memory_space<vmem>>, vector<32x384xf32>
    %c7 = arith.constant 7 : index
    %c0_107 = arith.constant 0 : index
    %c0_108 = arith.constant 0 : index
    %153 = vector.load %arg6[%c7, %c0_107, %c0_108] : memref<9x384x128xbf16, #tpu.memory_space<vmem>>, vector<1x384x128xbf16>
    %154 = vector.shape_cast %153 : vector<1x384x128xbf16> to vector<384x128xbf16>
    %c7_109 = arith.constant 7 : index
    %c0_110 = arith.constant 0 : index
    %c0_111 = arith.constant 0 : index
    %155 = vector.load %arg7[%c7_109, %c0_110, %c0_111] : memref<9x384x128xbf16, #tpu.memory_space<vmem>>, vector<1x384x128xbf16>
    %156 = vector.shape_cast %155 : vector<1x384x128xbf16> to vector<384x128xbf16>
    %157 = arith.truncf %152 : vector<32x384xf32> to vector<32x384xbf16>
    %158 = arith.extf %157 : vector<32x384xbf16> to vector<32x384xf32>
    %159 = arith.subf %152, %158 : vector<32x384xf32>
    %160 = arith.truncf %159 : vector<32x384xf32> to vector<32x384xbf16>
    %cst_112 = arith.constant dense<0.000000e+00> : vector<32x128xf32>
    %161 = tpu.matmul %157, %154, %cst_112 {dimension_numbers = #tpu.dot_dimension_numbers<[1], [0], [0], [1], [0, 0, 1, 1], [], []>} : vector<32x384xbf16>, vector<384x128xbf16>, vector<32x128xf32> -> vector<32x128xf32>
    %cst_113 = arith.constant dense<0.000000e+00> : vector<32x128xf32>
    %162 = tpu.matmul %160, %154, %cst_113 {dimension_numbers = #tpu.dot_dimension_numbers<[1], [0], [0], [1], [0, 0, 1, 1], [], []>} : vector<32x384xbf16>, vector<384x128xbf16>, vector<32x128xf32> -> vector<32x128xf32>
    %163 = arith.addf %161, %162 : vector<32x128xf32>
    %cst_114 = arith.constant dense<0.000000e+00> : vector<32x128xf32>
    %164 = tpu.matmul %157, %156, %cst_114 {dimension_numbers = #tpu.dot_dimension_numbers<[1], [0], [0], [1], [0, 0, 1, 1], [], []>} : vector<32x384xbf16>, vector<384x128xbf16>, vector<32x128xf32> -> vector<32x128xf32>
    %165 = arith.addf %163, %164 : vector<32x128xf32>
    %166 = arith.addf %151, %165 : vector<32x128xf32>
    %c64 = arith.constant 64 : index
    %c0_115 = arith.constant 0 : index
    %167 = vector.load %arg16[%c64, %c0_115] : memref<96x384xf32, #tpu.memory_space<vmem>>, vector<32x384xf32>
    %c8_116 = arith.constant 8 : index
    %c0_117 = arith.constant 0 : index
    %c0_118 = arith.constant 0 : index
    %168 = vector.load %arg6[%c8_116, %c0_117, %c0_118] : memref<9x384x128xbf16, #tpu.memory_space<vmem>>, vector<1x384x128xbf16>
    %169 = vector.shape_cast %168 : vector<1x384x128xbf16> to vector<384x128xbf16>
    %c8_119 = arith.constant 8 : index
    %c0_120 = arith.constant 0 : index
    %c0_121 = arith.constant 0 : index
    %170 = vector.load %arg7[%c8_119, %c0_120, %c0_121] : memref<9x384x128xbf16, #tpu.memory_space<vmem>>, vector<1x384x128xbf16>
    %171 = vector.shape_cast %170 : vector<1x384x128xbf16> to vector<384x128xbf16>
    %172 = arith.truncf %167 : vector<32x384xf32> to vector<32x384xbf16>
    %173 = arith.extf %172 : vector<32x384xbf16> to vector<32x384xf32>
    %174 = arith.subf %167, %173 : vector<32x384xf32>
    %175 = arith.truncf %174 : vector<32x384xf32> to vector<32x384xbf16>
    %cst_122 = arith.constant dense<0.000000e+00> : vector<32x128xf32>
    %176 = tpu.matmul %172, %169, %cst_122 {dimension_numbers = #tpu.dot_dimension_numbers<[1], [0], [0], [1], [0, 0, 1, 1], [], []>} : vector<32x384xbf16>, vector<384x128xbf16>, vector<32x128xf32> -> vector<32x128xf32>
    %cst_123 = arith.constant dense<0.000000e+00> : vector<32x128xf32>
    %177 = tpu.matmul %175, %169, %cst_123 {dimension_numbers = #tpu.dot_dimension_numbers<[1], [0], [0], [1], [0, 0, 1, 1], [], []>} : vector<32x384xbf16>, vector<384x128xbf16>, vector<32x128xf32> -> vector<32x128xf32>
    %178 = arith.addf %176, %177 : vector<32x128xf32>
    %cst_124 = arith.constant dense<0.000000e+00> : vector<32x128xf32>
    %179 = tpu.matmul %172, %171, %cst_124 {dimension_numbers = #tpu.dot_dimension_numbers<[1], [0], [0], [1], [0, 0, 1, 1], [], []>} : vector<32x384xbf16>, vector<384x128xbf16>, vector<32x128xf32> -> vector<32x128xf32>
    %180 = arith.addf %178, %179 : vector<32x128xf32>
    %181 = arith.addf %166, %180 : vector<32x128xf32>
    %c0_125 = arith.constant 0 : index
    %c0_126 = arith.constant 0 : index
    %182 = vector.load %arg8[%c0_125, %c0_126] : memref<1x128xf32, #tpu.memory_space<vmem>>, vector<1x128xf32>
    %183 = vector.broadcast %182 : vector<1x128xf32> to vector<32x128xf32>
    %184 = arith.addf %181, %183 : vector<32x128xf32>
    %cst_127 = arith.constant 0.000000e+00 : f32
    %185 = vector.broadcast %cst_127 : f32 to vector<32x128xf32>
    %186 = arith.maximumf %184, %185 : vector<32x128xf32>
    %187 = vector.extract_strided_slice %186 {offsets = [0, 0], sizes = [32, 64], strides = [1, 1]} : vector<32x128xf32> to vector<32x64xf32>
    %188 = vector.extract_strided_slice %186 {offsets = [0, 64], sizes = [32, 64], strides = [1, 1]} : vector<32x128xf32> to vector<32x64xf32>
    %189 = arith.maximumf %187, %188 : vector<32x64xf32>
    %190 = vector.extract_strided_slice %189 {offsets = [0, 0], sizes = [8, 64], strides = [1, 1]} : vector<32x64xf32> to vector<8x64xf32>
    %191 = vector.extract_strided_slice %189 {offsets = [8, 0], sizes = [8, 64], strides = [1, 1]} : vector<32x64xf32> to vector<8x64xf32>
    %192 = arith.maximumf %190, %191 : vector<8x64xf32>
    %193 = vector.extract_strided_slice %189 {offsets = [16, 0], sizes = [8, 64], strides = [1, 1]} : vector<32x64xf32> to vector<8x64xf32>
    %194 = vector.extract_strided_slice %189 {offsets = [24, 0], sizes = [8, 64], strides = [1, 1]} : vector<32x64xf32> to vector<8x64xf32>
    %195 = arith.maximumf %193, %194 : vector<8x64xf32>
    %196 = tpu.concatenate %192, %195 in 1 : vector<8x64xf32>, vector<8x64xf32> -> vector<8x128xf32>
    %c0_128 = arith.constant 0 : index
    %c0_129 = arith.constant 0 : index
    %197 = vector.load %arg9[%c0_128, %c0_129] : memref<128x64xf32, #tpu.memory_space<vmem>>, vector<128x64xf32>
    %cst_130 = arith.constant dense<0.000000e+00> : vector<8x64xf32>
    %198 = tpu.matmul %196, %197, %cst_130 {dimension_numbers = #tpu.dot_dimension_numbers<[1], [0], [0], [1], [0, 0, 1, 1], [], []>, precision = #tpu.contract_precision<fp32>} : vector<8x128xf32>, vector<128x64xf32>, vector<8x64xf32> -> vector<8x64xf32>
    %c0_131 = arith.constant 0 : index
    %c0_132 = arith.constant 0 : index
    %199 = vector.load %arg10[%c0_131, %c0_132] : memref<1x64xf32, #tpu.memory_space<vmem>>, vector<1x64xf32>
    %200 = vector.broadcast %199 : vector<1x64xf32> to vector<8x64xf32>
    %201 = arith.addf %198, %200 : vector<8x64xf32>
    %c0_133 = arith.constant 0 : index
    %c0_134 = arith.constant 0 : index
    %202 = vector.load %arg11[%c0_133, %c0_134] : memref<64x96xf32, #tpu.memory_space<vmem>>, vector<64x96xf32>
    %cst_135 = arith.constant dense<0.000000e+00> : vector<8x96xf32>
    %203 = tpu.matmul %201, %202, %cst_135 {dimension_numbers = #tpu.dot_dimension_numbers<[1], [0], [0], [1], [0, 0, 1, 1], [], []>, precision = #tpu.contract_precision<fp32>} : vector<8x64xf32>, vector<64x96xf32>, vector<8x96xf32> -> vector<8x96xf32>
    %c0_136 = arith.constant 0 : index
    %c0_137 = arith.constant 0 : index
    %204 = vector.load %arg12[%c0_136, %c0_137] : memref<1x96xf32, #tpu.memory_space<vmem>>, vector<1x96xf32>
    %205 = vector.broadcast %204 : vector<1x96xf32> to vector<8x96xf32>
    %206 = arith.addf %203, %205 : vector<8x96xf32>
    %c0_138 = arith.constant 0 : index
    %c0_139 = arith.constant 0 : index
    %207 = vector.load %arg13[%c0_138, %c0_139] : memref<96x10xf32, #tpu.memory_space<vmem>>, vector<96x10xf32>
    %cst_140 = arith.constant dense<0.000000e+00> : vector<8x10xf32>
    %208 = tpu.matmul %206, %207, %cst_140 {dimension_numbers = #tpu.dot_dimension_numbers<[1], [0], [0], [1], [0, 0, 1, 1], [], []>, precision = #tpu.contract_precision<fp32>} : vector<8x96xf32>, vector<96x10xf32>, vector<8x10xf32> -> vector<8x10xf32>
    %c0_141 = arith.constant 0 : index
    %c0_142 = arith.constant 0 : index
    %209 = vector.load %arg14[%c0_141, %c0_142] : memref<1x10xf32, #tpu.memory_space<vmem>>, vector<1x10xf32>
    %210 = vector.broadcast %209 : vector<1x10xf32> to vector<8x10xf32>
    %211 = arith.addf %208, %210 : vector<8x10xf32>
    %c0_143 = arith.constant 0 : index
    %c0_144 = arith.constant 0 : index
    %212 = vector.load %arg15[%c0_143, %c0_144] : memref<8x10xf32, #tpu.memory_space<vmem>>, vector<8x10xf32>
    tpu.vector_store %arg15[%c0_143, %c0_144], %211 {strides = array<i32>} : memref<8x10xf32, #tpu.memory_space<vmem>>, vector<8x10xf32>,
    return
  }
  func.func @transform_0(%arg0: i32) -> (i32, i32, i32) {
    %c0_i32 = arith.constant 0 : i32
    %c0_i32_0 = arith.constant 0 : i32
    %c0_i32_1 = arith.constant 0 : i32
    return %arg0, %c0_i32, %c0_i32_0 : i32, i32, i32
  }
  func.func @transform_1(%arg0: i32) -> (i32, i32, i32) {
    %c0_i32 = arith.constant 0 : i32
    %c0_i32_0 = arith.constant 0 : i32
    %c0_i32_1 = arith.constant 0 : i32
    return %arg0, %c0_i32, %c0_i32_0 : i32, i32, i32
  }
  func.func @transform_2(%arg0: i32) -> (i32, i32) {
    %c0_i32 = arith.constant 0 : i32
    %c0_i32_0 = arith.constant 0 : i32
    %c0_i32_1 = arith.constant 0 : i32
    return %c0_i32, %c0_i32_0 : i32, i32
  }
  func.func @transform_3(%arg0: i32) -> (i32, i32) {
    %c0_i32 = arith.constant 0 : i32
    %c0_i32_0 = arith.constant 0 : i32
    %c0_i32_1 = arith.constant 0 : i32
    return %c0_i32, %c0_i32_0 : i32, i32
  }
  func.func @transform_4(%arg0: i32) -> (i32, i32) {
    %c0_i32 = arith.constant 0 : i32
    %c0_i32_0 = arith.constant 0 : i32
    %c0_i32_1 = arith.constant 0 : i32
    return %c0_i32, %c0_i32_0 : i32, i32
  }
  func.func @transform_5(%arg0: i32) -> (i32, i32, i32) {
    %c0_i32 = arith.constant 0 : i32
    %c0_i32_0 = arith.constant 0 : i32
    %c0_i32_1 = arith.constant 0 : i32
    %c0_i32_2 = arith.constant 0 : i32
    return %c0_i32, %c0_i32_0, %c0_i32_1 : i32, i32, i32
  }
  func.func @transform_6(%arg0: i32) -> (i32, i32, i32) {
    %c0_i32 = arith.constant 0 : i32
    %c0_i32_0 = arith.constant 0 : i32
    %c0_i32_1 = arith.constant 0 : i32
    %c0_i32_2 = arith.constant 0 : i32
    return %c0_i32, %c0_i32_0, %c0_i32_1 : i32, i32, i32
  }
  func.func @transform_7(%arg0: i32) -> (i32, i32) {
    %c0_i32 = arith.constant 0 : i32
    %c0_i32_0 = arith.constant 0 : i32
    %c0_i32_1 = arith.constant 0 : i32
    return %c0_i32, %c0_i32_0 : i32, i32
  }
  func.func @transform_8(%arg0: i32) -> (i32, i32) {
    %c0_i32 = arith.constant 0 : i32
    %c0_i32_0 = arith.constant 0 : i32
    %c0_i32_1 = arith.constant 0 : i32
    return %c0_i32, %c0_i32_0 : i32, i32
  }
  func.func @transform_9(%arg0: i32) -> (i32, i32) {
    %c0_i32 = arith.constant 0 : i32
    %c0_i32_0 = arith.constant 0 : i32
    %c0_i32_1 = arith.constant 0 : i32
    return %c0_i32, %c0_i32_0 : i32, i32
  }
  func.func @transform_10(%arg0: i32) -> (i32, i32) {
    %c0_i32 = arith.constant 0 : i32
    %c0_i32_0 = arith.constant 0 : i32
    %c0_i32_1 = arith.constant 0 : i32
    return %c0_i32, %c0_i32_0 : i32, i32
  }
  func.func @transform_11(%arg0: i32) -> (i32, i32) {
    %c0_i32 = arith.constant 0 : i32
    %c0_i32_0 = arith.constant 0 : i32
    %c0_i32_1 = arith.constant 0 : i32
    return %c0_i32, %c0_i32_0 : i32, i32
  }
  func.func @transform_12(%arg0: i32) -> (i32, i32) {
    %c0_i32 = arith.constant 0 : i32
    %c0_i32_0 = arith.constant 0 : i32
    %c0_i32_1 = arith.constant 0 : i32
    return %c0_i32, %c0_i32_0 : i32, i32
  }
  func.func @transform_13(%arg0: i32) -> (i32, i32) {
    %c0_i32 = arith.constant 0 : i32
    %c0_i32_0 = arith.constant 0 : i32
    %c0_i32_1 = arith.constant 0 : i32
    return %c0_i32, %c0_i32_0 : i32, i32
  }
  func.func @transform_14(%arg0: i32) -> (i32, i32) {
    %c0_i32 = arith.constant 0 : i32
    %c0_i32_0 = arith.constant 0 : i32
    return %arg0, %c0_i32 : i32, i32
  }
}

</mosaic_0001>

<llo_original>
// kernel: tile.13
$region0: #{tile.13}
  #allocation0 [shape = 's32[1]{0}', space=sflag, size = 0x4, scoped, tag = 'scoped memory for tile.13']
  %s0 = inlined_call_operand.vmem [shape: f32[32], index: 0, kind: input, shape index: {}]
  %s1 = inlined_call_operand.vmem [shape: f32[24,32], index: 1, kind: output, shape index: {}]
  // Predicated region
  $region2: #{tile.13} parent=0 // pred_check
    _
  $region3: #{tile.13} parent=0 // pred_check_branch
    %3 = sbr.rel (0) target = $region5
  $region4: #{tile.13} parent=0 // pred_region
    _
  $region5: #{tile.13} parent=0 // pred_fallthru
    _
  %v4 = vld [vmem:[%s0] ss:$0 sm:$0xff]
  %5 = vst [vmem:[%s1] sm:$0xff] %v4
  %s6 = scalar_lea.vmem %s1, 8
  %7 = vst [vmem:[%s6] sm:$0xff] %v4
  %s8 = scalar_lea.vmem %s1, 16
  %9 = vst [vmem:[%s8] sm:$0xff] %v4

// kernel: tile.14
$region0: #{tile.14}
  %s0 = inlined_call_operand.vmem [shape: f32[24,32], index: 0, kind: input, shape index: {}]
  %s1 = inlined_call_operand.vmem [shape: f32[1,768], index: 1, kind: output, shape index: {}]
  $region1: #{tile.14} parent=0
    #allocation0 [shape = 'u8[24576]{0}', space=vmem, size = 0x6000, scoped, tag = 'scoped mem for output reshape']
    %v2 = vld [vmem:[%s0] ss:$4 sm:$0x3f]
    %vm3 = vcmask 261120
    %4 = vst.msk [vmem:[#allocation0] ss:$8 sm:$0xf] %vm3, %v2
    %5 = vst.msk [vmem:[#allocation0] ss:$8 sm:$0x30] %vm3, %v2
    %s6 = scalar_lea.vmem %s0, 3
    %v7 = vld [vmem:[%s6] ss:$4 sm:$0x3f]
    %8 = vrot.lane.b32.xlu0 %v7, 96
    %v9 = vpop.permute.xlu0 %8
    %vm10 = vcmask 1048320
    %11 = vst.msk [vmem:[#allocation0] ss:$8 sm:$0xf] %vm10, %v9
    %12 = vst.msk [vmem:[#allocation0] ss:$8 sm:$0x30] %vm10, %v9
    %s13 = scalar_lea.vmem %s0, 2
    %v14 = vld [vmem:[%s13] ss:$4 sm:$0x3f]
    %15 = vrot.lane.b32.xlu0 %v14, 64
    %v16 = vpop.permute.xlu0 %15
    %vm17 = vcmask 785920
    %18 = vst.msk [vmem:[#allocation0] ss:$8 sm:$0xf] %vm17, %v16
    %19 = vst.msk [vmem:[#allocation0] ss:$8 sm:$0x30] %vm17, %v16
    %s20 = scalar_lea.vmem %s0, 1
    %v21 = vld [vmem:[%s20] ss:$4 sm:$0x3f]
    %22 = vrot.lane.b32.xlu0 %v21, 32
    %v23 = vpop.permute.xlu0 %22
    %vm24 = vcmask 523520
    %25 = vst.msk [vmem:[#allocation0] ss:$8 sm:$0xf] %vm24, %v23
    %26 = vst.msk [vmem:[#allocation0] ss:$8 sm:$0x30] %vm24, %v23
    %s28 = sshll.u32 1, 1
    %s29 = ssub.s32 %s28, 1
    %v31 = vld [vmem:[#allocation0] sm:%s29]
    %s32 = sshll.u32 1, 1
    %s33 = ssub.s32 %s32, 1
    %34 = vst [vmem:[%s1] sm:%s33] %v31
    %s35 = scalar_lea.vmem [#allocation0], 8
    %v36 = vld [vmem:[%s35] sm:%s29]
    %s37 = sshll.u32 1, 1
    %s38 = ssub.s32 %s37, 1
    %s39 = scalar_lea.vmem %s1, 1
    %40 = vst [vmem:[%s39] sm:%s38] %v36
    %s41 = scalar_lea.vmem [#allocation0], 16
    %v42 = vld [vmem:[%s41] sm:%s29]
    %s43 = sshll.u32 1, 1
    %s44 = ssub.s32 %s43, 1
    %s45 = smul.addr 1, 2
    %s46 = scalar_lea.vmem %s1, %s45
    %47 = vst [vmem:[%s46] sm:%s44] %v42
    %s48 = scalar_lea.vmem [#allocation0], 24
    %v49 = vld [vmem:[%s48] sm:%s29]
    %s50 = sshll.u32 1, 1
    %s51 = ssub.s32 %s50, 1
    %s52 = smul.addr 1, 3
    %s53 = scalar_lea.vmem %s1, %s52
    %54 = vst [vmem:[%s53] sm:%s51] %v49
    %s55 = scalar_lea.vmem [#allocation0], 32
    %v56 = vld [vmem:[%s55] sm:%s29]
    %s57 = sshll.u32 1, 1
    %s58 = ssub.s32 %s57, 1
    %s59 = smul.addr 1, 4
    %s60 = scalar_lea.vmem %s1, %s59
    %61 = vst [vmem:[%s60] sm:%s58] %v56
    %s62 = scalar_lea.vmem [#allocation0], 40
    %v63 = vld [vmem:[%s62] sm:%s29]
    %s64 = sshll.u32 1, 1
    %s65 = ssub.s32 %s64, 1
    %s66 = smul.addr 1, 5
    %s67 = scalar_lea.vmem %s1, %s66
    %68 = vst [vmem:[%s67] sm:%s65] %v63

// kernel: tile.18
$region0: #{tile.18}
  #allocation0 [shape = 's32[1]{0}', space=sflag, size = 0x4, scoped, tag = 'scoped memory for tile.18']
  %s0 = inlined_call_operand.vmem [shape: f32[32], index: 0, kind: input, shape index: {}]
  %s1 = inlined_call_operand.vmem [shape: f32[4,32], index: 1, kind: output, shape index: {}]
  // Predicated region
  $region2: #{tile.18} parent=0 // pred_check
    _
  $region3: #{tile.18} parent=0 // pred_check_branch
    %3 = sbr.rel (0) target = $region5
  $region4: #{tile.18} parent=0 // pred_region
    _
  $region5: #{tile.18} parent=0 // pred_fallthru
    _
  %v4 = vld [vmem:[%s0] ss:$0 sm:$0xff]
  %5 = vst [vmem:[%s1] sm:$0xf] %v4

// kernel: tile.19
$region0: #{tile.19}
  %s0 = inlined_call_operand.vmem [shape: f32[4,32], index: 0, kind: input, shape index: {}]
  %s1 = inlined_call_operand.vmem [shape: f32[1,128], index: 1, kind: output, shape index: {}]
  $region1: #{tile.19} parent=0
    #allocation0 [shape = 'u8[4096]{0}', space=vmem, size = 0x1000, scoped, tag = 'scoped mem for output reshape']
    #allocation1 [shape = 'u8[4096]{0}', space=vmem, size = 0x1000, scoped, tag = 'scoped mem for input reshape']
    %s3 = sshll.u32 1, 4
    %s4 = ssub.s32 %s3, 1
    %v5 = vld [vmem:[%s0] sm:%s4]
    %6 = vst [vmem:[#allocation1] sm:%s4] %v5
    %v7 = vld [vmem:[#allocation1] sm:$0x1]
    %vm8 = vcmask 261120
    %9 = vst.msk [vmem:[#allocation0] sm:$0x1] %vm8, %v7
    %s10 = scalar_lea.vmem [#allocation1], 3
    %v11 = vld [vmem:[%s10] sm:$0x1]
    %12 = vrot.lane.b32.xlu0 %v11, 96
    %v13 = vpop.permute.xlu0 %12
    %vm14 = vcmask 1048320
    %15 = vst.msk [vmem:[#allocation0] sm:$0x1] %vm14, %v13
    %s16 = scalar_lea.vmem [#allocation1], 2
    %v17 = vld [vmem:[%s16] sm:$0x1]
    %18 = vrot.lane.b32.xlu0 %v17, 64
    %v19 = vpop.permute.xlu0 %18
    %vm20 = vcmask 785920
    %21 = vst.msk [vmem:[#allocation0] sm:$0x1] %vm20, %v19
    %s22 = scalar_lea.vmem [#allocation1], 1
    %v23 = vld [vmem:[%s22] sm:$0x1]
    %24 = vrot.lane.b32.xlu0 %v23, 32
    %v25 = vpop.permute.xlu0 %24
    %vm26 = vcmask 523520
    %27 = vst.msk [vmem:[#allocation0] sm:$0x1] %vm26, %v25
    %s29 = sshll.u32 1, 1
    %s30 = ssub.s32 %s29, 1
    %v32 = vld [vmem:[#allocation0] sm:%s30]
    %s33 = sshll.u32 1, 1
    %s34 = ssub.s32 %s33, 1
    %35 = vst [vmem:[%s1] sm:%s34] %v32

// kernel: cnn_model_forward.1
$region0: #{cnn_model_forward.1}
  #allocation0 [shape = 'u32[]', space=smem, size = 0x4, offset = 0x4, fixed_abs, tag = 'smem constant byte address 0x4 - core index']
  #allocation1 [shape = 'u32[144,128]{1,0:T(1,128)}', space=vmem, size = 0x12000, scoped, tag = 'internal scratch']
  #allocation2 [shape = 'f32[96,384]{1,0:T(8,128)}', space=vmem, size = 0x24000, scoped, tag = 'scratch operand']
  %s0 = inlined_call_operand.vmem [shape: f32[1,128,32], index: 0, kind: input, shape index: {}]
  %s1 = inlined_call_operand.vmem [shape: f32[1,128,32], index: 1, kind: input, shape index: {}]
  %s2 = inlined_call_operand.vmem [shape: bf16[288,768], index: 2, kind: input, shape index: {}]
  %s3 = inlined_call_operand.vmem [shape: bf16[288,768], index: 3, kind: input, shape index: {}]
  %s4 = inlined_call_operand.vmem [shape: f32[1,768], index: 4, kind: input, shape index: {}]
  %s5 = inlined_call_operand.vmem [shape: bf16[9,384,128], index: 5, kind: input, shape index: {}]
  %s6 = inlined_call_operand.vmem [shape: bf16[9,384,128], index: 6, kind: input, shape index: {}]
  %s7 = inlined_call_operand.vmem [shape: f32[1,128], index: 7, kind: input, shape index: {}]
  %s8 = inlined_call_operand.vmem [shape: f32[128,64], index: 8, kind: input, shape index: {}]
  %s9 = inlined_call_operand.vmem [shape: f32[1,64], index: 9, kind: input, shape index: {}]
  %s10 = inlined_call_operand.vmem [shape: f32[64,96], index: 10, kind: input, shape index: {}]
  %s11 = inlined_call_operand.vmem [shape: f32[1,96], index: 11, kind: input, shape index: {}]
  %s12 = inlined_call_operand.vmem [shape: f32[96,10], index: 12, kind: input, shape index: {}]
  %s13 = inlined_call_operand.vmem [shape: f32[1,10], index: 13, kind: input, shape index: {}]
  %s14 = inlined_call_operand.vmem [shape: f32[8,10], index: 14, kind: output, shape index: {}]
  %s15 = sld [smem:[#allocation0]]
  $region66: #{cnn_model_forward.1} parent=0
    _
  %s17 = ssub.s32 1, %s15
  %s18 = scalar_select 0, %s17, %s15
  // Predicated region
  $region2: #{cnn_model_forward.1} parent=0 // pred_check
    _
  $region3: #{cnn_model_forward.1} parent=0 // pred_check_branch
    %20 = sbr.rel (0) target = $region5
  $region4: #{cnn_model_forward.1} parent=0 // pred_region
    _
  $region5: #{cnn_model_forward.1} parent=0 // pred_fallthru
    _
  // Predicated region
  $region6: #{cnn_model_forward.1} parent=0 // pred_check
    _
  $region7: #{cnn_model_forward.1} parent=0 // pred_check_branch
    %22 = sbr.rel (0) target = $region9
  $region8: #{cnn_model_forward.1} parent=0 // pred_region
    _
  $region9: #{cnn_model_forward.1} parent=0 // pred_fallthru
    _
  // Predicated region
  $region10: #{cnn_model_forward.1} parent=0 // pred_check
    _
  $region11: #{cnn_model_forward.1} parent=0 // pred_check_branch
    %24 = sbr.rel (0) target = $region13
  $region12: #{cnn_model_forward.1} parent=0 // pred_region
    _
  $region13: #{cnn_model_forward.1} parent=0 // pred_fallthru
    _
  // Predicated region
  $region14: #{cnn_model_forward.1} parent=0 // pred_check
    _
  $region15: #{cnn_model_forward.1} parent=0 // pred_check_branch
    %26 = sbr.rel (0) target = $region17
  $region16: #{cnn_model_forward.1} parent=0 // pred_region
    _
  $region17: #{cnn_model_forward.1} parent=0 // pred_fallthru
    _
  // Predicated region
  $region18: #{cnn_model_forward.1} parent=0 // pred_check
    _
  $region19: #{cnn_model_forward.1} parent=0 // pred_check_branch
    %28 = sbr.rel (0) target = $region21
  $region20: #{cnn_model_forward.1} parent=0 // pred_region
    _
  $region21: #{cnn_model_forward.1} parent=0 // pred_fallthru
    _
  // Predicated region
  $region22: #{cnn_model_forward.1} parent=0 // pred_check
    _
  $region23: #{cnn_model_forward.1} parent=0 // pred_check_branch
    %30 = sbr.rel (0) target = $region25
  $region24: #{cnn_model_forward.1} parent=0 // pred_region
    _
  $region25: #{cnn_model_forward.1} parent=0 // pred_fallthru
    _
  // Predicated region
  $region26: #{cnn_model_forward.1} parent=0 // pred_check
    _
  $region27: #{cnn_model_forward.1} parent=0 // pred_check_branch
    %32 = sbr.rel (0) target = $region29
  $region28: #{cnn_model_forward.1} parent=0 // pred_region
    _
  $region29: #{cnn_model_forward.1} parent=0 // pred_fallthru
    _
  // Predicated region
  $region30: #{cnn_model_forward.1} parent=0 // pred_check
    _
  $region31: #{cnn_model_forward.1} parent=0 // pred_check_branch
    %34 = sbr.rel (0) target = $region33
  $region32: #{cnn_model_forward.1} parent=0 // pred_region
    _
  $region33: #{cnn_model_forward.1} parent=0 // pred_fallthru
    _
  // Predicated region
  $region34: #{cnn_model_forward.1} parent=0 // pred_check
    _
  $region35: #{cnn_model_forward.1} parent=0 // pred_check_branch
    %36 = sbr.rel (0) target = $region37
  $region36: #{cnn_model_forward.1} parent=0 // pred_region
    _
  $region37: #{cnn_model_forward.1} parent=0 // pred_fallthru
    _
  // Predicated region
  $region38: #{cnn_model_forward.1} parent=0 // pred_check
    _
  $region39: #{cnn_model_forward.1} parent=0 // pred_check_branch
    %38 = sbr.rel (0) target = $region41
  $region40: #{cnn_model_forward.1} parent=0 // pred_region
    _
  $region41: #{cnn_model_forward.1} parent=0 // pred_fallthru
    _
  // Predicated region
  $region42: #{cnn_model_forward.1} parent=0 // pred_check
    _
  $region43: #{cnn_model_forward.1} parent=0 // pred_check_branch
    %40 = sbr.rel (0) target = $region45
  $region44: #{cnn_model_forward.1} parent=0 // pred_region
    _
  $region45: #{cnn_model_forward.1} parent=0 // pred_fallthru
    _
  // Predicated region
  $region46: #{cnn_model_forward.1} parent=0 // pred_check
    _
  $region47: #{cnn_model_forward.1} parent=0 // pred_check_branch
    %42 = sbr.rel (0) target = $region49
  $region48: #{cnn_model_forward.1} parent=0 // pred_region
    _
  $region49: #{cnn_model_forward.1} parent=0 // pred_fallthru
    _
  // Predicated region
  $region50: #{cnn_model_forward.1} parent=0 // pred_check
    _
  $region51: #{cnn_model_forward.1} parent=0 // pred_check_branch
    %44 = sbr.rel (0) target = $region53
  $region52: #{cnn_model_forward.1} parent=0 // pred_region
    _
  $region53: #{cnn_model_forward.1} parent=0 // pred_fallthru
    _
  // Predicated region
  $region54: #{cnn_model_forward.1} parent=0 // pred_check
    _
  $region55: #{cnn_model_forward.1} parent=0 // pred_check_branch
    %46 = sbr.rel (0) target = $region57
  $region56: #{cnn_model_forward.1} parent=0 // pred_region
    _
  $region57: #{cnn_model_forward.1} parent=0 // pred_fallthru
    _
  %v48 = vld [vmem:[%s0] sm:$0xff]
  %v49 = vld [vmem:[%s0 + $0x8] sm:$0xff]
  %v50 = vld [vmem:[%s0 + $0x10] sm:$0xff]
  %v51 = vld [vmem:[%s0 + $0x18] sm:$0xff]
  %v52 = vld [vmem:[%s0 + $0x20] sm:$0xff]
  %v53 = vld [vmem:[%s0 + $0x28] sm:$0xff]
  %v54 = vld [vmem:[%s0 + $0x30] sm:$0xff]
  %v55 = vld [vmem:[%s0 + $0x38] sm:$0xff]
  %v56 = vld [vmem:[%s0 + $0x40] sm:$0xff]
  %v57 = vld [vmem:[%s0 + $0x48] sm:$0xff]
  %v58 = vld [vmem:[%s0 + $0x50] sm:$0xff]
  %v59 = vld [vmem:[%s0 + $0x58] sm:$0xff]
  %v60 = vld [vmem:[%s0 + $0x60] sm:$0xff]
  %v61 = vld [vmem:[%s0 + $0x68] sm:$0xff]
  %v62 = vld [vmem:[%s0 + $0x70] sm:$0xff]
  %v63 = vld [vmem:[%s0 + $0x78] sm:$0xff]
  %v64 = vld [vmem:[%s1] sm:$0xff]
  %v65 = vld [vmem:[%s1 + $0x8] sm:$0xff]
  %v66 = vld [vmem:[%s1 + $0x10] sm:$0xff]
  %v67 = vld [vmem:[%s1 + $0x18] sm:$0xff]
  %v68 = vld [vmem:[%s1 + $0x20] sm:$0xff]
  %v69 = vld [vmem:[%s1 + $0x28] sm:$0xff]
  %v70 = vld [vmem:[%s1 + $0x30] sm:$0xff]
  %v71 = vld [vmem:[%s1 + $0x38] sm:$0xff]
  %v72 = vld [vmem:[%s1 + $0x40] sm:$0xff]
  %v73 = vld [vmem:[%s1 + $0x48] sm:$0xff]
  %v74 = vld [vmem:[%s1 + $0x50] sm:$0xff]
  %v75 = vld [vmem:[%s1 + $0x58] sm:$0xff]
  %v76 = vld [vmem:[%s1 + $0x60] sm:$0xff]
  %v77 = vld [vmem:[%s1 + $0x68] sm:$0xff]
  %v78 = vld [vmem:[%s1 + $0x70] sm:$0xff]
  %v79 = vld [vmem:[%s1 + $0x78] sm:$0xff]
  %92 = vrot.lane.b32.xlu0 %v64, 32
  %v93 = vpop.permute.xlu0 %92
  %94 = vrot.lane.b32.xlu0 %v65, 32
  %v95 = vpop.permute.xlu0 %94
  %96 = vrot.lane.b32.xlu0 %v66, 32
  %v97 = vpop.permute.xlu0 %96
  %98 = vrot.lane.b32.xlu0 %v67, 32
  %v99 = vpop.permute.xlu0 %98
  %100 = vrot.lane.b32.xlu0 %v68, 32
  %v101 = vpop.permute.xlu0 %100
  %102 = vrot.lane.b32.xlu0 %v69, 32
  %v103 = vpop.permute.xlu0 %102
  %104 = vrot.lane.b32.xlu0 %v70, 32
  %v105 = vpop.permute.xlu0 %104
  %106 = vrot.lane.b32.xlu0 %v71, 32
  %v107 = vpop.permute.xlu0 %106
  %108 = vrot.lane.b32.xlu0 %v72, 32
  %v109 = vpop.permute.xlu0 %108
  %110 = vrot.lane.b32.xlu0 %v73, 32
  %v111 = vpop.permute.xlu0 %110
  %112 = vrot.lane.b32.xlu0 %v74, 32
  %v113 = vpop.permute.xlu0 %112
  %114 = vrot.lane.b32.xlu0 %v75, 32
  %v115 = vpop.permute.xlu0 %114
  %140 = vrot.lane.b32.xlu0 %v49, 64
  %v141 = vpop.permute.xlu0 %140
  %142 = vrot.lane.b32.xlu0 %v50, 64
  %v143 = vpop.permute.xlu0 %142
  %144 = vrot.lane.b32.xlu0 %v51, 64
  %v145 = vpop.permute.xlu0 %144
  %146 = vrot.lane.b32.xlu0 %v52, 64
  %v147 = vpop.permute.xlu0 %146
  %148 = vrot.lane.b32.xlu0 %v53, 64
  %v149 = vpop.permute.xlu0 %148
  %150 = vrot.lane.b32.xlu0 %v54, 64
  %v151 = vpop.permute.xlu0 %150
  %152 = vrot.lane.b32.xlu0 %v55, 64
  %v153 = vpop.permute.xlu0 %152
  %154 = vrot.lane.b32.xlu0 %v56, 64
  %v155 = vpop.permute.xlu0 %154
  %156 = vrot.lane.b32.xlu0 %v57, 64
  %v157 = vpop.permute.xlu0 %156
  %158 = vrot.lane.b32.xlu0 %v58, 64
  %v159 = vpop.permute.xlu0 %158
  %160 = vrot.lane.b32.xlu0 %v59, 64
  %v161 = vpop.permute.xlu0 %160
  %162 = vrot.lane.b32.xlu0 %v60, 64
  %v163 = vpop.permute.xlu0 %162
  %177 = vrot.lane.b32.xlu0 %v65, 96
  %v178 = vpop.permute.xlu0 %177
  %179 = vrot.lane.b32.xlu0 %v66, 96
  %v180 = vpop.permute.xlu0 %179
  %181 = vrot.lane.b32.xlu0 %v67, 96
  %v182 = vpop.permute.xlu0 %181
  %183 = vrot.lane.b32.xlu0 %v68, 96
  %v184 = vpop.permute.xlu0 %183
  %185 = vrot.lane.b32.xlu0 %v69, 96
  %v186 = vpop.permute.xlu0 %185
  %187 = vrot.lane.b32.xlu0 %v70, 96
  %v188 = vpop.permute.xlu0 %187
  %189 = vrot.lane.b32.xlu0 %v71, 96
  %v190 = vpop.permute.xlu0 %189
  %191 = vrot.lane.b32.xlu0 %v72, 96
  %v192 = vpop.permute.xlu0 %191
  %193 = vrot.lane.b32.xlu0 %v73, 96
  %v194 = vpop.permute.xlu0 %193
  %195 = vrot.lane.b32.xlu0 %v74, 96
  %v196 = vpop.permute.xlu0 %195
  %197 = vrot.lane.b32.xlu0 %v75, 96
  %v198 = vpop.permute.xlu0 %197
  %199 = vrot.lane.b32.xlu0 %v76, 96
  %v200 = vpop.permute.xlu0 %199
  %214 = vrot.lane.b32.xlu0 %v76, 32
  %v215 = vpop.permute.xlu0 %214
  %216 = vrot.lane.b32.xlu0 %v77, 32
  %v217 = vpop.permute.xlu0 %216
  %222 = vrot.lane.b32.xlu0 %v61, 64
  %v223 = vpop.permute.xlu0 %222
  %224 = vrot.lane.b32.xlu0 %v62, 64
  %v225 = vpop.permute.xlu0 %224
  %229 = vrot.lane.b32.xlu0 %v77, 96
  %v230 = vpop.permute.xlu0 %229
  %231 = vrot.lane.b32.xlu0 %v78, 96
  %v232 = vpop.permute.xlu0 %231
  %vm235 = vcmask 261120
  %v236 = vsel %vm235, %v48, %v93
  %v237 = vsel %vm235, %v49, %v95
  %v238 = vsel %vm235, %v50, %v97
  %v239 = vsel %vm235, %v51, %v99
  %v240 = vsel %vm235, %v52, %v101
  %v241 = vsel %vm235, %v53, %v103
  %v242 = vsel %vm235, %v54, %v105
  %v243 = vsel %vm235, %v55, %v107
  %v244 = vsel %vm235, %v56, %v109
  %v245 = vsel %vm235, %v57, %v111
  %v246 = vsel %vm235, %v58, %v113
  %v247 = vsel %vm235, %v59, %v115
  %vm248 = vcmask 523264
  %v249 = vsel %vm248, %v236, %v141
  %v250 = vsel %vm248, %v237, %v143
  %v251 = vsel %vm248, %v238, %v145
  %v252 = vsel %vm248, %v239, %v147
  %v253 = vsel %vm248, %v240, %v149
  %v254 = vsel %vm248, %v241, %v151
  %v255 = vsel %vm248, %v242, %v153
  %v256 = vsel %vm248, %v243, %v155
  %v257 = vsel %vm248, %v244, %v157
  %v258 = vsel %vm248, %v245, %v159
  %v259 = vsel %vm248, %v246, %v161
  %v260 = vsel %vm248, %v247, %v163
  %vm261 = vcmask 785408
  %v262 = vsel %vm261, %v249, %v178
  %v263 = vsel %vm261, %v250, %v180
  %v264 = vsel %vm261, %v251, %v182
  %v265 = vsel %vm261, %v252, %v184
  %v266 = vsel %vm261, %v253, %v186
  %v267 = vsel %vm261, %v254, %v188
  %v268 = vsel %vm261, %v255, %v190
  %v269 = vsel %vm261, %v256, %v192
  %v270 = vsel %vm261, %v257, %v194
  %v271 = vsel %vm261, %v258, %v196
  %v272 = vsel %vm261, %v259, %v198
  %v273 = vsel %vm261, %v260, %v200
  %v274 = vsel %vm235, %v60, %v215
  %v275 = vsel %vm235, %v61, %v217
  %v276 = vsel %vm248, %v274, %v223
  %v277 = vsel %vm248, %v275, %v225
  %v278 = vsel %vm261, %v276, %v230
  %v279 = vsel %vm261, %v277, %v232
  %280 = vrot.lane.b32.xlu0 %v49, 32
  %v281 = vpop.permute.xlu0 %280
  %282 = vrot.lane.b32.xlu0 %v50, 32
  %v283 = vpop.permute.xlu0 %282
  %284 = vrot.lane.b32.xlu0 %v51, 32
  %v285 = vpop.permute.xlu0 %284
  %286 = vrot.lane.b32.xlu0 %v52, 32
  %v287 = vpop.permute.xlu0 %286
  %288 = vrot.lane.b32.xlu0 %v53, 32
  %v289 = vpop.permute.xlu0 %288
  %290 = vrot.lane.b32.xlu0 %v54, 32
  %v291 = vpop.permute.xlu0 %290
  %292 = vrot.lane.b32.xlu0 %v55, 32
  %v293 = vpop.permute.xlu0 %292
  %294 = vrot.lane.b32.xlu0 %v56, 32
  %v295 = vpop.permute.xlu0 %294
  %296 = vrot.lane.b32.xlu0 %v57, 32
  %v297 = vpop.permute.xlu0 %296
  %298 = vrot.lane.b32.xlu0 %v58, 32
  %v299 = vpop.permute.xlu0 %298
  %300 = vrot.lane.b32.xlu0 %v59, 32
  %v301 = vpop.permute.xlu0 %300
  %302 = vrot.lane.b32.xlu0 %v60, 32
  %v303 = vpop.permute.xlu0 %302
  %316 = vrot.lane.b32.xlu0 %v65, 64
  %v317 = vpop.permute.xlu0 %316
  %318 = vrot.lane.b32.xlu0 %v66, 64
  %v319 = vpop.permute.xlu0 %318
  %320 = vrot.lane.b32.xlu0 %v67, 64
  %v321 = vpop.permute.xlu0 %320
  %322 = vrot.lane.b32.xlu0 %v68, 64
  %v323 = vpop.permute.xlu0 %322
  %324 = vrot.lane.b32.xlu0 %v69, 64
  %v325 = vpop.permute.xlu0 %324
  %326 = vrot.lane.b32.xlu0 %v70, 64
  %v327 = vpop.permute.xlu0 %326
  %328 = vrot.lane.b32.xlu0 %v71, 64
  %v329 = vpop.permute.xlu0 %328
  %330 = vrot.lane.b32.xlu0 %v72, 64
  %v331 = vpop.permute.xlu0 %330
  %332 = vrot.lane.b32.xlu0 %v73, 64
  %v333 = vpop.permute.xlu0 %332
  %334 = vrot.lane.b32.xlu0 %v74, 64
  %v335 = vpop.permute.xlu0 %334
  %336 = vrot.lane.b32.xlu0 %v75, 64
  %v337 = vpop.permute.xlu0 %336
  %338 = vrot.lane.b32.xlu0 %v76, 64
  %v339 = vpop.permute.xlu0 %338
  %352 = vrot.lane.b32.xlu0 %v50, 96
  %v353 = vpop.permute.xlu0 %352
  %354 = vrot.lane.b32.xlu0 %v51, 96
  %v355 = vpop.permute.xlu0 %354
  %356 = vrot.lane.b32.xlu0 %v52, 96
  %v357 = vpop.permute.xlu0 %356
  %358 = vrot.lane.b32.xlu0 %v53, 96
  %v359 = vpop.permute.xlu0 %358
  %360 = vrot.lane.b32.xlu0 %v54, 96
  %v361 = vpop.permute.xlu0 %360
  %362 = vrot.lane.b32.xlu0 %v55, 96
  %v363 = vpop.permute.xlu0 %362
  %364 = vrot.lane.b32.xlu0 %v56, 96
  %v365 = vpop.permute.xlu0 %364
  %366 = vrot.lane.b32.xlu0 %v57, 96
  %v367 = vpop.permute.xlu0 %366
  %368 = vrot.lane.b32.xlu0 %v58, 96
  %v369 = vpop.permute.xlu0 %368
  %370 = vrot.lane.b32.xlu0 %v59, 96
  %v371 = vpop.permute.xlu0 %370
  %372 = vrot.lane.b32.xlu0 %v60, 96
  %v373 = vpop.permute.xlu0 %372
  %374 = vrot.lane.b32.xlu0 %v61, 96
  %v375 = vpop.permute.xlu0 %374
  %388 = vrot.lane.b32.xlu0 %v61, 32
  %v389 = vpop.permute.xlu0 %388
  %390 = vrot.lane.b32.xlu0 %v62, 32
  %v391 = vpop.permute.xlu0 %390
  %394 = vrot.lane.b32.xlu0 %v77, 64
  %v395 = vpop.permute.xlu0 %394
  %396 = vrot.lane.b32.xlu0 %v78, 64
  %v397 = vpop.permute.xlu0 %396
  %401 = vrot.lane.b32.xlu0 %v62, 96
  %v402 = vpop.permute.xlu0 %401
  %403 = vrot.lane.b32.xlu0 %v63, 96
  %v404 = vpop.permute.xlu0 %403
  %v407 = vsel %vm235, %v64, %v281
  %v408 = vsel %vm235, %v65, %v283
  %v409 = vsel %vm235, %v66, %v285
  %v410 = vsel %vm235, %v67, %v287
  %v411 = vsel %vm235, %v68, %v289
  %v412 = vsel %vm235, %v69, %v291
  %v413 = vsel %vm235, %v70, %v293
  %v414 = vsel %vm235, %v71, %v295
  %v415 = vsel %vm235, %v72, %v297
  %v416 = vsel %vm235, %v73, %v299
  %v417 = vsel %vm235, %v74, %v301
  %v418 = vsel %vm235, %v75, %v303
  %v419 = vsel %vm248, %v407, %v317
  %v420 = vsel %vm248, %v408, %v319
  %v421 = vsel %vm248, %v409, %v321
  %v422 = vsel %vm248, %v410, %v323
  %v423 = vsel %vm248, %v411, %v325
  %v424 = vsel %vm248, %v412, %v327
  %v425 = vsel %vm248, %v413, %v329
  %v426 = vsel %vm248, %v414, %v331
  %v427 = vsel %vm248, %v415, %v333
  %v428 = vsel %vm248, %v416, %v335
  %v429 = vsel %vm248, %v417, %v337
  %v430 = vsel %vm248, %v418, %v339
  %v431 = vsel %vm261, %v419, %v353
  %v432 = vsel %vm261, %v420, %v355
  %v433 = vsel %vm261, %v421, %v357
  %v434 = vsel %vm261, %v422, %v359
  %v435 = vsel %vm261, %v423, %v361
  %v436 = vsel %vm261, %v424, %v363
  %v437 = vsel %vm261, %v425, %v365
  %v438 = vsel %vm261, %v426, %v367
  %v439 = vsel %vm261, %v427, %v369
  %v440 = vsel %vm261, %v428, %v371
  %v441 = vsel %vm261, %v429, %v373
  %v442 = vsel %vm261, %v430, %v375
  %v443 = vsel %vm235, %v76, %v389
  %v444 = vsel %vm235, %v77, %v391
  %v445 = vsel %vm248, %v443, %v395
  %v446 = vsel %vm248, %v444, %v397
  %v447 = vsel %vm261, %v445, %v402
  %v448 = vsel %vm261, %v446, %v404
  %v449 = vld [vmem:[%s2] sm:$0xff]
  %v450 = vld [vmem:[%s2 + $0x8] sm:$0xff]
  %v451 = vld [vmem:[%s2 + $0x10] sm:$0xff]
  %v452 = vld [vmem:[%s2 + $0x18] sm:$0xff]
  %v453 = vld [vmem:[%s2 + $0x20] sm:$0xff]
  %v454 = vld [vmem:[%s2 + $0x28] sm:$0xff]
  %v455 = vld [vmem:[%s2 + $0x30] sm:$0xff]
  %v456 = vld [vmem:[%s2 + $0x38] sm:$0xff]
  %v457 = vld [vmem:[%s2 + $0x40] sm:$0xff]
  %v458 = vld [vmem:[%s2 + $0x48] sm:$0xff]
  %v459 = vld [vmem:[%s2 + $0x50] sm:$0xff]
  %v460 = vld [vmem:[%s2 + $0x58] sm:$0xff]
  %v461 = vld [vmem:[%s2 + $0x60] sm:$0xff]
  %v462 = vld [vmem:[%s2 + $0x68] sm:$0xff]
  %v463 = vld [vmem:[%s2 + $0x70] sm:$0xff]
  %v464 = vld [vmem:[%s2 + $0x78] sm:$0xff]
  %v465 = vld [vmem:[%s2 + $0x80] sm:$0xff]
  %v466 = vld [vmem:[%s2 + $0x88] sm:$0xff]
  %v467 = vld [vmem:[%s2 + $0x90] sm:$0xff]
  %v468 = vld [vmem:[%s2 + $0x98] sm:$0xff]
  %v469 = vld [vmem:[%s2 + $0xa0] sm:$0xff]
  %v470 = vld [vmem:[%s2 + $0xa8] sm:$0xff]
  %v471 = vld [vmem:[%s2 + $0xb0] sm:$0xff]
  %v472 = vld [vmem:[%s2 + $0xb8] sm:$0xff]
  %v473 = vld [vmem:[%s2 + $0xc0] sm:$0xff]
  %v474 = vld [vmem:[%s2 + $0xc8] sm:$0xff]
  %v475 = vld [vmem:[%s2 + $0xd0] sm:$0xff]
  %v476 = vld [vmem:[%s2 + $0xd8] sm:$0xff]
  %v477 = vld [vmem:[%s2 + $0xe0] sm:$0xff]
  %v478 = vld [vmem:[%s2 + $0xe8] sm:$0xff]
  %v479 = vld [vmem:[%s2 + $0xf0] sm:$0xff]
  %v480 = vld [vmem:[%s2 + $0xf8] sm:$0xff]
  %v481 = vld [vmem:[%s2 + $0x100] sm:$0xff]
  %v482 = vld [vmem:[%s2 + $0x108] sm:$0xff]
  %v483 = vld [vmem:[%s2 + $0x110] sm:$0xff]
  %v484 = vld [vmem:[%s2 + $0x118] sm:$0xff]
  %v485 = vld [vmem:[%s2 + $0x120] sm:$0xff]
  %v486 = vld [vmem:[%s2 + $0x128] sm:$0xff]
  %v487 = vld [vmem:[%s2 + $0x130] sm:$0xff]
  %v488 = vld [vmem:[%s2 + $0x138] sm:$0xff]
  %v489 = vld [vmem:[%s2 + $0x140] sm:$0xff]
  %v490 = vld [vmem:[%s2 + $0x148] sm:$0xff]
  %v491 = vld [vmem:[%s2 + $0x150] sm:$0xff]
  %v492 = vld [vmem:[%s2 + $0x158] sm:$0xff]
  %v493 = vld [vmem:[%s2 + $0x160] sm:$0xff]
  %v494 = vld [vmem:[%s2 + $0x168] sm:$0xff]
  %v495 = vld [vmem:[%s2 + $0x170] sm:$0xff]
  %v496 = vld [vmem:[%s2 + $0x178] sm:$0xff]
  %v497 = vld [vmem:[%s2 + $0x180] sm:$0xff]
  %v498 = vld [vmem:[%s2 + $0x188] sm:$0xff]
  %v499 = vld [vmem:[%s2 + $0x190] sm:$0xff]
  %v500 = vld [vmem:[%s2 + $0x198] sm:$0xff]
  %v501 = vld [vmem:[%s2 + $0x1a0] sm:$0xff]
  %v502 = vld [vmem:[%s2 + $0x1a8] sm:$0xff]
  %v503 = vld [vmem:[%s2 + $0x1b0] sm:$0xff]
  %v504 = vld [vmem:[%s2 + $0x1b8] sm:$0xff]
  %v505 = vld [vmem:[%s2 + $0x1c0] sm:$0xff]
  %v506 = vld [vmem:[%s2 + $0x1c8] sm:$0xff]
  %v507 = vld [vmem:[%s2 + $0x1d0] sm:$0xff]
  %v508 = vld [vmem:[%s2 + $0x1d8] sm:$0xff]
  %v509 = vld [vmem:[%s2 + $0x1e0] sm:$0xff]
  %v510 = vld [vmem:[%s2 + $0x1e8] sm:$0xff]
  %v511 = vld [vmem:[%s2 + $0x1f0] sm:$0xff]
  %v512 = vld [vmem:[%s2 + $0x1f8] sm:$0xff]
  %v513 = vld [vmem:[%s2 + $0x200] sm:$0xff]
  %v514 = vld [vmem:[%s2 + $0x208] sm:$0xff]
  %v515 = vld [vmem:[%s2 + $0x210] sm:$0xff]
  %v516 = vld [vmem:[%s2 + $0x218] sm:$0xff]
  %v517 = vld [vmem:[%s2 + $0x220] sm:$0xff]
  %v518 = vld [vmem:[%s2 + $0x228] sm:$0xff]
  %v519 = vld [vmem:[%s2 + $0x230] sm:$0xff]
  %v520 = vld [vmem:[%s2 + $0x238] sm:$0xff]
  %v521 = vld [vmem:[%s2 + $0x240] sm:$0xff]
  %v522 = vld [vmem:[%s2 + $0x248] sm:$0xff]
  %v523 = vld [vmem:[%s2 + $0x250] sm:$0xff]
  %v524 = vld [vmem:[%s2 + $0x258] sm:$0xff]
  %v525 = vld [vmem:[%s2 + $0x260] sm:$0xff]
  %v526 = vld [vmem:[%s2 + $0x268] sm:$0xff]
  %v527 = vld [vmem:[%s2 + $0x270] sm:$0xff]
  %v528 = vld [vmem:[%s2 + $0x278] sm:$0xff]
  %v529 = vld [vmem:[%s2 + $0x280] sm:$0xff]
  %v530 = vld [vmem:[%s2 + $0x288] sm:$0xff]
  %v531 = vld [vmem:[%s2 + $0x290] sm:$0xff]
  %v532 = vld [vmem:[%s2 + $0x298] sm:$0xff]
  %v533 = vld [vmem:[%s2 + $0x2a0] sm:$0xff]
  %v534 = vld [vmem:[%s2 + $0x2a8] sm:$0xff]
  %v535 = vld [vmem:[%s2 + $0x2b0] sm:$0xff]
  %v536 = vld [vmem:[%s2 + $0x2b8] sm:$0xff]
  %v537 = vld [vmem:[%s2 + $0x2c0] sm:$0xff]
  %v538 = vld [vmem:[%s2 + $0x2c8] sm:$0xff]
  %v539 = vld [vmem:[%s2 + $0x2d0] sm:$0xff]
  %v540 = vld [vmem:[%s2 + $0x2d8] sm:$0xff]
  %v541 = vld [vmem:[%s2 + $0x2e0] sm:$0xff]
  %v542 = vld [vmem:[%s2 + $0x2e8] sm:$0xff]
  %v543 = vld [vmem:[%s2 + $0x2f0] sm:$0xff]
  %v544 = vld [vmem:[%s2 + $0x2f8] sm:$0xff]
  %v545 = vld [vmem:[%s2 + $0x300] sm:$0xff]
  %v546 = vld [vmem:[%s2 + $0x308] sm:$0xff]
  %v547 = vld [vmem:[%s2 + $0x310] sm:$0xff]
  %v548 = vld [vmem:[%s2 + $0x318] sm:$0xff]
  %v549 = vld [vmem:[%s2 + $0x320] sm:$0xff]
  %v550 = vld [vmem:[%s2 + $0x328] sm:$0xff]
  %v551 = vld [vmem:[%s2 + $0x330] sm:$0xff]
  %v552 = vld [vmem:[%s2 + $0x338] sm:$0xff]
  %v553 = vld [vmem:[%s2 + $0x340] sm:$0xff]
  %v554 = vld [vmem:[%s2 + $0x348] sm:$0xff]
  %v555 = vld [vmem:[%s2 + $0x350] sm:$0xff]
  %v556 = vld [vmem:[%s2 + $0x358] sm:$0xff]
  %v557 = vld [vmem:[%s3] sm:$0xff]
  %v558 = vld [vmem:[%s3 + $0x8] sm:$0xff]
  %v559 = vld [vmem:[%s3 + $0x10] sm:$0xff]
  %v560 = vld [vmem:[%s3 + $0x18] sm:$0xff]
  %v561 = vld [vmem:[%s3 + $0x20] sm:$0xff]
  %v562 = vld [vmem:[%s3 + $0x28] sm:$0xff]
  %v563 = vld [vmem:[%s3 + $0x30] sm:$0xff]
  %v564 = vld [vmem:[%s3 + $0x38] sm:$0xff]
  %v565 = vld [vmem:[%s3 + $0x40] sm:$0xff]
  %v566 = vld [vmem:[%s3 + $0x48] sm:$0xff]
  %v567 = vld [vmem:[%s3 + $0x50] sm:$0xff]
  %v568 = vld [vmem:[%s3 + $0x58] sm:$0xff]
  %v569 = vld [vmem:[%s3 + $0x60] sm:$0xff]
  %v570 = vld [vmem:[%s3 + $0x68] sm:$0xff]
  %v571 = vld [vmem:[%s3 + $0x70] sm:$0xff]
  %v572 = vld [vmem:[%s3 + $0x78] sm:$0xff]
  %v573 = vld [vmem:[%s3 + $0x80] sm:$0xff]
  %v574 = vld [vmem:[%s3 + $0x88] sm:$0xff]
  %v575 = vld [vmem:[%s3 + $0x90] sm:$0xff]
  %v576 = vld [vmem:[%s3 + $0x98] sm:$0xff]
  %v577 = vld [vmem:[%s3 + $0xa0] sm:$0xff]
  %v578 = vld [vmem:[%s3 + $0xa8] sm:$0xff]
  %v579 = vld [vmem:[%s3 + $0xb0] sm:$0xff]
  %v580 = vld [vmem:[%s3 + $0xb8] sm:$0xff]
  %v581 = vld [vmem:[%s3 + $0xc0] sm:$0xff]
  %v582 = vld [vmem:[%s3 + $0xc8] sm:$0xff]
  %v583 = vld [vmem:[%s3 + $0xd0] sm:$0xff]
  %v584 = vld [vmem:[%s3 + $0xd8] sm:$0xff]
  %v585 = vld [vmem:[%s3 + $0xe0] sm:$0xff]
  %v586 = vld [vmem:[%s3 + $0xe8] sm:$0xff]
  %v587 = vld [vmem:[%s3 + $0xf0] sm:$0xff]
  %v588 = vld [vmem:[%s3 + $0xf8] sm:$0xff]
  %v589 = vld [vmem:[%s3 + $0x100] sm:$0xff]
  %v590 = vld [vmem:[%s3 + $0x108] sm:$0xff]
  %v591 = vld [vmem:[%s3 + $0x110] sm:$0xff]
  %v592 = vld [vmem:[%s3 + $0x118] sm:$0xff]
  %v593 = vld [vmem:[%s3 + $0x120] sm:$0xff]
  %v594 = vld [vmem:[%s3 + $0x128] sm:$0xff]
  %v595 = vld [vmem:[%s3 + $0x130] sm:$0xff]
  %v596 = vld [vmem:[%s3 + $0x138] sm:$0xff]
  %v597 = vld [vmem:[%s3 + $0x140] sm:$0xff]
  %v598 = vld [vmem:[%s3 + $0x148] sm:$0xff]
  %v599 = vld [vmem:[%s3 + $0x150] sm:$0xff]
  %v600 = vld [vmem:[%s3 + $0x158] sm:$0xff]
  %v601 = vld [vmem:[%s3 + $0x160] sm:$0xff]
  %v602 = vld [vmem:[%s3 + $0x168] sm:$0xff]
  %v603 = vld [vmem:[%s3 + $0x170] sm:$0xff]
  %v604 = vld [vmem:[%s3 + $0x178] sm:$0xff]
  %v605 = vld [vmem:[%s3 + $0x180] sm:$0xff]
  %v606 = vld [vmem:[%s3 + $0x188] sm:$0xff]
  %v607 = vld [vmem:[%s3 + $0x190] sm:$0xff]
  %v608 = vld [vmem:[%s3 + $0x198] sm:$0xff]
  %v609 = vld [vmem:[%s3 + $0x1a0] sm:$0xff]
  %v610 = vld [vmem:[%s3 + $0x1a8] sm:$0xff]
  %v611 = vld [vmem:[%s3 + $0x1b0] sm:$0xff]
  %v612 = vld [vmem:[%s3 + $0x1b8] sm:$0xff]
  %v613 = vld [vmem:[%s3 + $0x1c0] sm:$0xff]
  %v614 = vld [vmem:[%s3 + $0x1c8] sm:$0xff]
  %v615 = vld [vmem:[%s3 + $0x1d0] sm:$0xff]
  %v616 = vld [vmem:[%s3 + $0x1d8] sm:$0xff]
  %v617 = vld [vmem:[%s3 + $0x1e0] sm:$0xff]
  %v618 = vld [vmem:[%s3 + $0x1e8] sm:$0xff]
  %v619 = vld [vmem:[%s3 + $0x1f0] sm:$0xff]
  %v620 = vld [vmem:[%s3 + $0x1f8] sm:$0xff]
  %v621 = vld [vmem:[%s3 + $0x200] sm:$0xff]
  %v622 = vld [vmem:[%s3 + $0x208] sm:$0xff]
  %v623 = vld [vmem:[%s3 + $0x210] sm:$0xff]
  %v624 = vld [vmem:[%s3 + $0x218] sm:$0xff]
  %v625 = vld [vmem:[%s3 + $0x220] sm:$0xff]
  %v626 = vld [vmem:[%s3 + $0x228] sm:$0xff]
  %v627 = vld [vmem:[%s3 + $0x230] sm:$0xff]
  %v628 = vld [vmem:[%s3 + $0x238] sm:$0xff]
  %v629 = vld [vmem:[%s3 + $0x240] sm:$0xff]
  %v630 = vld [vmem:[%s3 + $0x248] sm:$0xff]
  %v631 = vld [vmem:[%s3 + $0x250] sm:$0xff]
  %v632 = vld [vmem:[%s3 + $0x258] sm:$0xff]
  %v633 = vld [vmem:[%s3 + $0x260] sm:$0xff]
  %v634 = vld [vmem:[%s3 + $0x268] sm:$0xff]
  %v635 = vld [vmem:[%s3 + $0x270] sm:$0xff]
  %v636 = vld [vmem:[%s3 + $0x278] sm:$0xff]
  %v637 = vld [vmem:[%s3 + $0x280] sm:$0xff]
  %v638 = vld [vmem:[%s3 + $0x288] sm:$0xff]
  %v639 = vld [vmem:[%s3 + $0x290] sm:$0xff]
  %v640 = vld [vmem:[%s3 + $0x298] sm:$0xff]
  %v641 = vld [vmem:[%s3 + $0x2a0] sm:$0xff]
  %v642 = vld [vmem:[%s3 + $0x2a8] sm:$0xff]
  %v643 = vld [vmem:[%s3 + $0x2b0] sm:$0xff]
  %v644 = vld [vmem:[%s3 + $0x2b8] sm:$0xff]
  %v645 = vld [vmem:[%s3 + $0x2c0] sm:$0xff]
  %v646 = vld [vmem:[%s3 + $0x2c8] sm:$0xff]
  %v647 = vld [vmem:[%s3 + $0x2d0] sm:$0xff]
  %v648 = vld [vmem:[%s3 + $0x2d8] sm:$0xff]
  %v649 = vld [vmem:[%s3 + $0x2e0] sm:$0xff]
  %v650 = vld [vmem:[%s3 + $0x2e8] sm:$0xff]
  %v651 = vld [vmem:[%s3 + $0x2f0] sm:$0xff]
  %v652 = vld [vmem:[%s3 + $0x2f8] sm:$0xff]
  %v653 = vld [vmem:[%s3 + $0x300] sm:$0xff]
  %v654 = vld [vmem:[%s3 + $0x308] sm:$0xff]
  %v655 = vld [vmem:[%s3 + $0x310] sm:$0xff]
  %v656 = vld [vmem:[%s3 + $0x318] sm:$0xff]
  %v657 = vld [vmem:[%s3 + $0x320] sm:$0xff]
  %v658 = vld [vmem:[%s3 + $0x328] sm:$0xff]
  %v659 = vld [vmem:[%s3 + $0x330] sm:$0xff]
  %v660 = vld [vmem:[%s3 + $0x338] sm:$0xff]
  %v661 = vld [vmem:[%s3 + $0x340] sm:$0xff]
  %v662 = vld [vmem:[%s3 + $0x348] sm:$0xff]
  %v663 = vld [vmem:[%s3 + $0x350] sm:$0xff]
  %v664 = vld [vmem:[%s3 + $0x358] sm:$0xff]
  %v665 = vpack.c.bf16 %v263, %v262
  %v666 = vpack.c.bf16 %v265, %v264
  %v667 = vpack.c.bf16 %v53, %v52
  %v668 = vpack.c.bf16 %v267, %v266
  %v669 = vpack.c.bf16 %v55, %v54
  %v670 = vpack.c.bf16 %v269, %v268
  %v671 = vpack.c.bf16 %v57, %v56
  %v672 = vpack.c.bf16 %v271, %v270
  %v673 = vpack.c.bf16 %v59, %v58
  %v674 = vpack.c.bf16 %v273, %v272
  %v675 = vpack.c.bf16 %v61, %v60
  %v676 = vpack.c.bf16 %v279, %v278
  %v677 = vpack.c.bf16 %v63, %v62
  %v678 = vpack.c.bf16 %v432, %v431
  %v679 = vpack.c.bf16 %v434, %v433
  %v680 = vpack.c.bf16 %v69, %v68
  %v681 = vpack.c.bf16 %v436, %v435
  %v682 = vpack.c.bf16 %v71, %v70
  %v683 = vpack.c.bf16 %v438, %v437
  %v684 = vpack.c.bf16 %v73, %v72
  %v685 = vpack.c.bf16 %v440, %v439
  %v686 = vpack.c.bf16 %v75, %v74
  %v687 = vpack.c.bf16 %v442, %v441
  %v688 = vpack.c.bf16 %v77, %v76
  %v689 = vpack.c.bf16 %v448, %v447
  %v690 = vpack.c.bf16 %v79, %v78
  %v691 = vunpack.c.l.bf16 %v665
  %v692 = vunpack.c.l.bf16 %v666
  %v693 = vunpack.c.l.bf16 %v667
  %v694 = vunpack.c.h.bf16 %v665
  %v695 = vunpack.c.h.bf16 %v666
  %v696 = vunpack.c.h.bf16 %v667
  %v697 = vunpack.c.l.bf16 %v668
  %v698 = vunpack.c.l.bf16 %v669
  %v699 = vunpack.c.h.bf16 %v668
  %v700 = vunpack.c.h.bf16 %v669
  %v701 = vunpack.c.l.bf16 %v670
  %v702 = vunpack.c.l.bf16 %v671
  %v703 = vunpack.c.h.bf16 %v670
  %v704 = vunpack.c.h.bf16 %v671
  %v705 = vunpack.c.l.bf16 %v672
  %v706 = vunpack.c.l.bf16 %v673
  %v707 = vunpack.c.h.bf16 %v672
  %v708 = vunpack.c.h.bf16 %v673
  %v709 = vunpack.c.l.bf16 %v674
  %v710 = vunpack.c.l.bf16 %v675
  %v711 = vunpack.c.h.bf16 %v674
  %v712 = vunpack.c.h.bf16 %v675
  %v713 = vunpack.c.l.bf16 %v676
  %v714 = vunpack.c.l.bf16 %v677
  %v715 = vunpack.c.h.bf16 %v676
  %v716 = vunpack.c.h.bf16 %v677
  %v717 = vunpack.c.l.bf16 %v678
  %v718 = vunpack.c.l.bf16 %v679
  %v719 = vunpack.c.l.bf16 %v680
  %v720 = vunpack.c.h.bf16 %v678
  %v721 = vunpack.c.h.bf16 %v679
  %v722 = vunpack.c.h.bf16 %v680
  %v723 = vunpack.c.l.bf16 %v681
  %v724 = vunpack.c.l.bf16 %v682
  %v725 = vunpack.c.h.bf16 %v681
  %v726 = vunpack.c.h.bf16 %v682
  %v727 = vunpack.c.l.bf16 %v683
  %v728 = vunpack.c.l.bf16 %v684
  %v729 = vunpack.c.h.bf16 %v683
  %v730 = vunpack.c.h.bf16 %v684
  %v731 = vunpack.c.l.bf16 %v685
  %v732 = vunpack.c.l.bf16 %v686
  %v733 = vunpack.c.h.bf16 %v685
  %v734 = vunpack.c.h.bf16 %v686
  %v735 = vunpack.c.l.bf16 %v687
  %v736 = vunpack.c.l.bf16 %v688
  %v737 = vunpack.c.h.bf16 %v687
  %v738 = vunpack.c.h.bf16 %v688
  %v739 = vunpack.c.l.bf16 %v689
  %v740 = vunpack.c.l.bf16 %v690
  %v741 = vunpack.c.h.bf16 %v689
  %v742 = vunpack.c.h.bf16 %v690
  %v743 = vsub.f32 %v262, %v691
  %v744 = vsub.f32 %v264, %v692
  %v745 = vsub.f32 %v52, %v693
  %v746 = vsub.f32 %v263, %v694
  %v747 = vsub.f32 %v265, %v695
  %v748 = vsub.f32 %v53, %v696
  %v749 = vsub.f32 %v266, %v697
  %v750 = vsub.f32 %v54, %v698
  %v751 = vsub.f32 %v267, %v699
  %v752 = vsub.f32 %v55, %v700
  %v753 = vsub.f32 %v268, %v701
  %v754 = vsub.f32 %v56, %v702
  %v755 = vsub.f32 %v269, %v703
  %v756 = vsub.f32 %v57, %v704
  %v757 = vsub.f32 %v270, %v705
  %v758 = vsub.f32 %v58, %v706
  %v759 = vsub.f32 %v271, %v707
  %v760 = vsub.f32 %v59, %v708
  %v761 = vsub.f32 %v272, %v709
  %v762 = vsub.f32 %v60, %v710
  %v763 = vsub.f32 %v273, %v711
  %v764 = vsub.f32 %v61, %v712
  %v765 = vsub.f32 %v278, %v713
  %v766 = vsub.f32 %v62, %v714
  %v767 = vsub.f32 %v279, %v715
  %v768 = vsub.f32 %v63, %v716
  %v769 = vsub.f32 %v431, %v717
  %v770 = vsub.f32 %v433, %v718
  %v771 = vsub.f32 %v68, %v719
  %v772 = vsub.f32 %v432, %v720
  %v773 = vsub.f32 %v434, %v721
  %v774 = vsub.f32 %v69, %v722
  %v775 = vsub.f32 %v435, %v723
  %v776 = vsub.f32 %v70, %v724
  %v777 = vsub.f32 %v436, %v725
  %v778 = vsub.f32 %v71, %v726
  %v779 = vsub.f32 %v437, %v727
  %v780 = vsub.f32 %v72, %v728
  %v781 = vsub.f32 %v438, %v729
  %v782 = vsub.f32 %v73, %v730
  %v783 = vsub.f32 %v439, %v731
  %v784 = vsub.f32 %v74, %v732
  %v785 = vsub.f32 %v440, %v733
  %v786 = vsub.f32 %v75, %v734
  %v787 = vsub.f32 %v441, %v735
  %v788 = vsub.f32 %v76, %v736
  %v789 = vsub.f32 %v442, %v737
  %v790 = vsub.f32 %v77, %v738
  %v791 = vsub.f32 %v447, %v739
  %v792 = vsub.f32 %v78, %v740
  %v793 = vsub.f32 %v448, %v741
  %v794 = vsub.f32 %v79, %v742
  %v795 = vpack.c.bf16 %v746, %v743
  %v796 = vpack.c.bf16 %v747, %v744
  %v797 = vpack.c.bf16 %v748, %v745
  %v798 = vpack.c.bf16 %v751, %v749
  %v799 = vpack.c.bf16 %v752, %v750
  %v800 = vpack.c.bf16 %v755, %v753
  %v801 = vpack.c.bf16 %v756, %v754
  %v802 = vpack.c.bf16 %v759, %v757
  %v803 = vpack.c.bf16 %v760, %v758
  %v804 = vpack.c.bf16 %v763, %v761
  %v805 = vpack.c.bf16 %v764, %v762
  %v806 = vpack.c.bf16 %v767, %v765
  %v807 = vpack.c.bf16 %v768, %v766
  %v808 = vpack.c.bf16 %v772, %v769
  %v809 = vpack.c.bf16 %v773, %v770
  %v810 = vpack.c.bf16 %v774, %v771
  %v811 = vpack.c.bf16 %v777, %v775
  %v812 = vpack.c.bf16 %v778, %v776
  %v813 = vpack.c.bf16 %v781, %v779
  %v814 = vpack.c.bf16 %v782, %v780
  %v815 = vpack.c.bf16 %v785, %v783
  %v816 = vpack.c.bf16 %v786, %v784
  %v817 = vpack.c.bf16 %v789, %v787
  %v818 = vpack.c.bf16 %v790, %v788
  %v819 = vpack.c.bf16 %v793, %v791
  %v820 = vpack.c.bf16 %v794, %v792
  %v929 = vunpack.c.l.b16 %v449
  %v930 = vunpack.c.h.b16 %v449
  %v931 = vunpack.c.l.b16 %v450
  %v932 = vunpack.c.h.b16 %v450
  %v933 = vunpack.c.l.b16 %v451
  %v934 = vunpack.c.h.b16 %v451
  %v935 = vunpack.c.l.b16 %v452
  %v936 = vunpack.c.h.b16 %v452
  %v937 = vunpack.c.l.b16 %v453
  %v938 = vunpack.c.h.b16 %v453
  %v939 = vunpack.c.l.b16 %v454
  %v940 = vunpack.c.h.b16 %v454
  %v941 = vunpack.c.l.b16 %v455
  %v942 = vunpack.c.h.b16 %v455
  %v943 = vunpack.c.l.b16 %v456
  %v944 = vunpack.c.h.b16 %v456
  %v945 = vunpack.c.l.b16 %v457
  %v946 = vunpack.c.h.b16 %v457
  %v947 = vunpack.c.l.b16 %v458
  %v948 = vunpack.c.h.b16 %v458
  %v949 = vunpack.c.l.b16 %v459
  %v950 = vunpack.c.h.b16 %v459
  %v951 = vunpack.c.l.b16 %v460
  %v952 = vunpack.c.h.b16 %v460
  %v953 = vunpack.c.l.b16 %v461
  %v954 = vunpack.c.h.b16 %v461
  %v955 = vunpack.c.l.b16 %v462
  %v956 = vunpack.c.h.b16 %v462
  %v957 = vunpack.c.l.b16 %v463
  %v958 = vunpack.c.h.b16 %v463
  %v959 = vunpack.c.l.b16 %v464
  %v960 = vunpack.c.h.b16 %v464
  %v961 = vunpack.c.l.b16 %v465
  %v962 = vunpack.c.h.b16 %v465
  %v963 = vunpack.c.l.b16 %v466
  %v964 = vunpack.c.h.b16 %v466
  %v965 = vunpack.c.l.b16 %v467
  %v966 = vunpack.c.h.b16 %v467
  %v967 = vunpack.c.l.b16 %v468
  %v968 = vunpack.c.h.b16 %v468
  %v969 = vunpack.c.l.b16 %v469
  %v970 = vunpack.c.h.b16 %v469
  %v971 = vunpack.c.l.b16 %v470
  %v972 = vunpack.c.h.b16 %v470
  %v973 = vunpack.c.l.b16 %v471
  %v974 = vunpack.c.h.b16 %v471
  %v975 = vunpack.c.l.b16 %v472
  %v976 = vunpack.c.h.b16 %v472
  %v977 = vunpack.c.l.b16 %v473
  %v978 = vunpack.c.h.b16 %v473
  %v979 = vunpack.c.l.b16 %v474
  %v980 = vunpack.c.h.b16 %v474
  %v981 = vunpack.c.l.b16 %v475
  %v982 = vunpack.c.h.b16 %v475
  %v983 = vunpack.c.l.b16 %v476
  %v984 = vunpack.c.h.b16 %v476
  %v985 = vunpack.c.l.b16 %v477
  %v986 = vunpack.c.h.b16 %v477
  %v987 = vunpack.c.l.b16 %v478
  %v988 = vunpack.c.h.b16 %v478
  %v989 = vunpack.c.l.b16 %v479
  %v990 = vunpack.c.h.b16 %v479
  %v991 = vunpack.c.l.b16 %v480
  %v992 = vunpack.c.h.b16 %v480
  %v993 = vunpack.c.l.b16 %v481
  %v994 = vunpack.c.h.b16 %v481
  %v995 = vunpack.c.l.b16 %v482
  %v996 = vunpack.c.h.b16 %v482
  %v997 = vunpack.c.l.b16 %v483
  %v998 = vunpack.c.h.b16 %v483
  %v999 = vunpack.c.l.b16 %v484
  %v1000 = vunpack.c.h.b16 %v484
  %v1001 = vunpack.c.l.b16 %v485
  %v1002 = vunpack.c.h.b16 %v485
  %v1003 = vunpack.c.l.b16 %v486
  %v1004 = vunpack.c.h.b16 %v486
  %v1005 = vunpack.c.l.b16 %v487
  %v1006 = vunpack.c.h.b16 %v487
  %v1007 = vunpack.c.l.b16 %v488
  %v1008 = vunpack.c.h.b16 %v488
  %v1009 = vunpack.c.l.b16 %v489
  %v1010 = vunpack.c.h.b16 %v489
  %v1011 = vunpack.c.l.b16 %v490
  %v1012 = vunpack.c.h.b16 %v490
  %v1013 = vunpack.c.l.b16 %v491
  %v1014 = vunpack.c.h.b16 %v491
  %v1015 = vunpack.c.l.b16 %v492
  %v1016 = vunpack.c.h.b16 %v492
  %v1017 = vunpack.c.l.b16 %v493
  %v1018 = vunpack.c.h.b16 %v493
  %v1019 = vunpack.c.l.b16 %v494
  %v1020 = vunpack.c.h.b16 %v494
  %v1021 = vunpack.c.l.b16 %v495
  %v1022 = vunpack.c.h.b16 %v495
  %v1023 = vunpack.c.l.b16 %v496
  %v1024 = vunpack.c.h.b16 %v496
  %v1025 = vunpack.c.l.b16 %v497
  %v1026 = vunpack.c.h.b16 %v497
  %v1027 = vunpack.c.l.b16 %v498
  %v1028 = vunpack.c.h.b16 %v498
  %v1029 = vunpack.c.l.b16 %v499
  %v1030 = vunpack.c.h.b16 %v499
  %v1031 = vunpack.c.l.b16 %v500
  %v1032 = vunpack.c.h.b16 %v500
  %v1033 = vunpack.c.l.b16 %v501
  %v1034 = vunpack.c.h.b16 %v501
  %v1035 = vunpack.c.l.b16 %v502
  %v1036 = vunpack.c.h.b16 %v502
  %v1037 = vunpack.c.l.b16 %v503
  %v1038 = vunpack.c.h.b16 %v503
  %v1039 = vunpack.c.l.b16 %v504
  %v1040 = vunpack.c.h.b16 %v504
  %v1041 = vunpack.c.l.b16 %v505
  %v1042 = vunpack.c.h.b16 %v505
  %v1043 = vunpack.c.l.b16 %v506
  %v1044 = vunpack.c.h.b16 %v506
  %v1045 = vunpack.c.l.b16 %v507
  %v1046 = vunpack.c.h.b16 %v507
  %v1047 = vunpack.c.l.b16 %v508
  %v1048 = vunpack.c.h.b16 %v508
  %v1049 = vunpack.c.l.b16 %v509
  %v1050 = vunpack.c.h.b16 %v509
  %v1051 = vunpack.c.l.b16 %v510
  %v1052 = vunpack.c.h.b16 %v510
  %v1053 = vunpack.c.l.b16 %v511
  %v1054 = vunpack.c.h.b16 %v511
  %v1055 = vunpack.c.l.b16 %v512
  %v1056 = vunpack.c.h.b16 %v512
  %v1057 = vunpack.c.l.b16 %v513
  %v1058 = vunpack.c.h.b16 %v513
  %v1059 = vunpack.c.l.b16 %v514
  %v1060 = vunpack.c.h.b16 %v514
  %v1061 = vunpack.c.l.b16 %v515
  %v1062 = vunpack.c.h.b16 %v515
  %v1063 = vunpack.c.l.b16 %v516
  %v1064 = vunpack.c.h.b16 %v516
  %v1065 = vunpack.c.l.b16 %v517
  %v1066 = vunpack.c.h.b16 %v517
  %v1067 = vunpack.c.l.b16 %v518
  %v1068 = vunpack.c.h.b16 %v518
  %v1069 = vunpack.c.l.b16 %v519
  %v1070 = vunpack.c.h.b16 %v519
  %v1071 = vunpack.c.l.b16 %v520
  %v1072 = vunpack.c.h.b16 %v520
  %v1073 = vunpack.c.l.b16 %v521
  %v1074 = vunpack.c.h.b16 %v521
  %v1075 = vunpack.c.l.b16 %v522
  %v1076 = vunpack.c.h.b16 %v522
  %v1077 = vunpack.c.l.b16 %v523
  %v1078 = vunpack.c.h.b16 %v523
  %v1079 = vunpack.c.l.b16 %v524
  %v1080 = vunpack.c.h.b16 %v524
  %v1081 = vunpack.c.l.b16 %v525
  %v1082 = vunpack.c.h.b16 %v525
  %v1083 = vunpack.c.l.b16 %v526
  %v1084 = vunpack.c.h.b16 %v526
  %v1085 = vunpack.c.l.b16 %v527
  %v1086 = vunpack.c.h.b16 %v527
  %v1087 = vunpack.c.l.b16 %v528
  %v1088 = vunpack.c.h.b16 %v528
  %v1089 = vunpack.c.l.b16 %v529
  %v1090 = vunpack.c.h.b16 %v529
  %v1091 = vunpack.c.l.b16 %v530
  %v1092 = vunpack.c.h.b16 %v530
  %v1093 = vunpack.c.l.b16 %v531
  %v1094 = vunpack.c.h.b16 %v531
  %v1095 = vunpack.c.l.b16 %v532
  %v1096 = vunpack.c.h.b16 %v532
  %v1097 = vunpack.c.l.b16 %v533
  %v1098 = vunpack.c.h.b16 %v533
  %v1099 = vunpack.c.l.b16 %v534
  %v1100 = vunpack.c.h.b16 %v534
  %v1101 = vunpack.c.l.b16 %v535
  %v1102 = vunpack.c.h.b16 %v535
  %v1103 = vunpack.c.l.b16 %v536
  %v1104 = vunpack.c.h.b16 %v536
  %v1105 = vunpack.c.l.b16 %v537
  %v1106 = vunpack.c.h.b16 %v537
  %v1107 = vunpack.c.l.b16 %v538
  %v1108 = vunpack.c.h.b16 %v538
  %v1109 = vunpack.c.l.b16 %v539
  %v1110 = vunpack.c.h.b16 %v539
  %v1111 = vunpack.c.l.b16 %v540
  %v1112 = vunpack.c.h.b16 %v540
  %v1113 = vunpack.c.l.b16 %v541
  %v1114 = vunpack.c.h.b16 %v541
  %v1115 = vunpack.c.l.b16 %v542
  %v1116 = vunpack.c.h.b16 %v542
  %v1117 = vunpack.c.l.b16 %v543
  %v1118 = vunpack.c.h.b16 %v543
  %v1119 = vunpack.c.l.b16 %v544
  %v1120 = vunpack.c.h.b16 %v544
  %v1121 = vunpack.c.l.b16 %v545
  %v1122 = vunpack.c.h.b16 %v545
  %v1123 = vunpack.c.l.b16 %v546
  %v1124 = vunpack.c.h.b16 %v546
  %v1125 = vunpack.c.l.b16 %v547
  %v1126 = vunpack.c.h.b16 %v547
  %v1127 = vunpack.c.l.b16 %v548
  %v1128 = vunpack.c.h.b16 %v548
  %v1129 = vunpack.c.l.b16 %v549
  %v1130 = vunpack.c.h.b16 %v549
  %v1131 = vunpack.c.l.b16 %v550
  %v1132 = vunpack.c.h.b16 %v550
  %v1133 = vunpack.c.l.b16 %v551
  %v1134 = vunpack.c.h.b16 %v551
  %v1135 = vunpack.c.l.b16 %v552
  %v1136 = vunpack.c.h.b16 %v552
  %v1137 = vunpack.c.l.b16 %v553
  %v1138 = vunpack.c.h.b16 %v553
  %v1139 = vunpack.c.l.b16 %v554
  %v1140 = vunpack.c.h.b16 %v554
  %v1141 = vunpack.c.l.b16 %v555
  %v1142 = vunpack.c.h.b16 %v555
  %v1143 = vunpack.c.l.b16 %v556
  %v1144 = vunpack.c.h.b16 %v556
  %v1145 = vpack.c.b16 %v935, %v929
  %v1146 = vpack.c.b16 %v936, %v930
  %v1147 = vpack.c.b16 %v937, %v931
  %v1148 = vpack.c.b16 %v938, %v932
  %v1149 = vpack.c.b16 %v939, %v933
  %v1150 = vpack.c.b16 %v940, %v934
  %v1151 = vpack.c.b16 %v947, %v941
  %v1152 = vpack.c.b16 %v948, %v942
  %v1153 = vpack.c.b16 %v949, %v943
  %v1154 = vpack.c.b16 %v950, %v944
  %v1155 = vpack.c.b16 %v951, %v945
  %v1156 = vpack.c.b16 %v952, %v946
  %v1157 = vpack.c.b16 %v959, %v953
  %v1158 = vpack.c.b16 %v960, %v954
  %v1159 = vpack.c.b16 %v961, %v955
  %v1160 = vpack.c.b16 %v962, %v956
  %v1161 = vpack.c.b16 %v963, %v957
  %v1162 = vpack.c.b16 %v964, %v958
  %v1163 = vpack.c.b16 %v971, %v965
  %v1164 = vpack.c.b16 %v972, %v966
  %v1165 = vpack.c.b16 %v973, %v967
  %v1166 = vpack.c.b16 %v974, %v968
  %v1167 = vpack.c.b16 %v975, %v969
  %v1168 = vpack.c.b16 %v976, %v970
  %v1169 = vpack.c.b16 %v983, %v977
  %v1170 = vpack.c.b16 %v984, %v978
  %v1171 = vpack.c.b16 %v985, %v979
  %v1172 = vpack.c.b16 %v986, %v980
  %v1173 = vpack.c.b16 %v987, %v981
  %v1174 = vpack.c.b16 %v988, %v982
  %v1175 = vpack.c.b16 %v995, %v989
  %v1176 = vpack.c.b16 %v996, %v990
  %v1177 = vpack.c.b16 %v997, %v991
  %v1178 = vpack.c.b16 %v998, %v992
  %v1179 = vpack.c.b16 %v999, %v993
  %v1180 = vpack.c.b16 %v1000, %v994
  %v1181 = vpack.c.b16 %v1007, %v1001
  %v1182 = vpack.c.b16 %v1008, %v1002
  %v1183 = vpack.c.b16 %v1009, %v1003
  %v1184 = vpack.c.b16 %v1010, %v1004
  %v1185 = vpack.c.b16 %v1011, %v1005
  %v1186 = vpack.c.b16 %v1012, %v1006
  %v1187 = vpack.c.b16 %v1019, %v1013
  %v1188 = vpack.c.b16 %v1020, %v1014
  %v1189 = vpack.c.b16 %v1021, %v1015
  %v1190 = vpack.c.b16 %v1022, %v1016
  %v1191 = vpack.c.b16 %v1023, %v1017
  %v1192 = vpack.c.b16 %v1024, %v1018
  %v1193 = vpack.c.b16 %v1031, %v1025
  %v1194 = vpack.c.b16 %v1032, %v1026
  %v1195 = vpack.c.b16 %v1033, %v1027
  %v1196 = vpack.c.b16 %v1034, %v1028
  %v1197 = vpack.c.b16 %v1035, %v1029
  %v1198 = vpack.c.b16 %v1036, %v1030
  %v1199 = vpack.c.b16 %v1043, %v1037
  %v1200 = vpack.c.b16 %v1044, %v1038
  %v1201 = vpack.c.b16 %v1045, %v1039
  %v1202 = vpack.c.b16 %v1046, %v1040
  %v1203 = vpack.c.b16 %v1047, %v1041
  %v1204 = vpack.c.b16 %v1048, %v1042
  %v1205 = vpack.c.b16 %v1055, %v1049
  %v1206 = vpack.c.b16 %v1056, %v1050
  %v1207 = vpack.c.b16 %v1057, %v1051
  %v1208 = vpack.c.b16 %v1058, %v1052
  %v1209 = vpack.c.b16 %v1059, %v1053
  %v1210 = vpack.c.b16 %v1060, %v1054
  %v1211 = vpack.c.b16 %v1067, %v1061
  %v1212 = vpack.c.b16 %v1068, %v1062
  %v1213 = vpack.c.b16 %v1069, %v1063
  %v1214 = vpack.c.b16 %v1070, %v1064
  %v1215 = vpack.c.b16 %v1071, %v1065
  %v1216 = vpack.c.b16 %v1072, %v1066
  %v1217 = vpack.c.b16 %v1079, %v1073
  %v1218 = vpack.c.b16 %v1080, %v1074
  %v1219 = vpack.c.b16 %v1081, %v1075
  %v1220 = vpack.c.b16 %v1082, %v1076
  %v1221 = vpack.c.b16 %v1083, %v1077
  %v1222 = vpack.c.b16 %v1084, %v1078
  %v1223 = vpack.c.b16 %v1091, %v1085
  %v1224 = vpack.c.b16 %v1092, %v1086
  %v1225 = vpack.c.b16 %v1093, %v1087
  %v1226 = vpack.c.b16 %v1094, %v1088
  %v1227 = vpack.c.b16 %v1095, %v1089
  %v1228 = vpack.c.b16 %v1096, %v1090
  %v1229 = vpack.c.b16 %v1103, %v1097
  %v1230 = vpack.c.b16 %v1104, %v1098
  %v1231 = vpack.c.b16 %v1105, %v1099
  %v1232 = vpack.c.b16 %v1106, %v1100
  %v1233 = vpack.c.b16 %v1107, %v1101
  %v1234 = vpack.c.b16 %v1108, %v1102
  %v1235 = vpack.c.b16 %v1115, %v1109
  %v1236 = vpack.c.b16 %v1116, %v1110
  %v1237 = vpack.c.b16 %v1117, %v1111
  %v1238 = vpack.c.b16 %v1118, %v1112
  %v1239 = vpack.c.b16 %v1119, %v1113
  %v1240 = vpack.c.b16 %v1120, %v1114
  %v1241 = vpack.c.b16 %v1127, %v1121
  %v1242 = vpack.c.b16 %v1128, %v1122
  %v1243 = vpack.c.b16 %v1129, %v1123
  %v1244 = vpack.c.b16 %v1130, %v1124
  %v1245 = vpack.c.b16 %v1131, %v1125
  %v1246 = vpack.c.b16 %v1132, %v1126
  %v1247 = vpack.c.b16 %v1139, %v1133
  %v1248 = vpack.c.b16 %v1140, %v1134
  %v1249 = vpack.c.b16 %v1141, %v1135
  %v1250 = vpack.c.b16 %v1142, %v1136
  %v1251 = vpack.c.b16 %v1143, %v1137
  %v1252 = vpack.c.b16 %v1144, %v1138
  %v1362 = vsel %vm235, %v797, 0
  %v1365 = vsel %vm235, %v799, 0
  %v1368 = vsel %vm235, %v801, 0
  %v1371 = vsel %vm235, %v803, 0
  %v1374 = vsel %vm235, %v805, 0
  %v1377 = vsel %vm235, %v807, 0
  %v1380 = vsel %vm235, %v810, 0
  %v1383 = vsel %vm235, %v812, 0
  %v1386 = vsel %vm235, %v814, 0
  %v1389 = vsel %vm235, %v816, 0
  %v1392 = vsel %vm235, %v818, 0
  %v1395 = vsel %vm235, %v820, 0
  %1397 = vmatprep.subr.bf16.mxu0 %v1188
  %1398 = vmatpush1.bf16.msra.mxu0 %v1187
  %1399 = vmatprep.subr.bf16.mxu0 %v1182
  %1400 = vmatpush1.bf16.msra.mxu0 %v1181
  %1401 = vmatprep.subr.bf16.mxu0 %v1176
  %1402 = vmatpush1.bf16.msra.mxu0 %v1175
  %1403 = vmatprep.subr.bf16.mxu0 %v1170
  %1404 = vmatpush1.bf16.msra.mxu0 %v1169
  %1405 = vmatprep.subr.bf16.mxu0 %v1164
  %1406 = vmatpush1.bf16.msra.mxu0 %v1163
  %1407 = vmatprep.subr.bf16.mxu0 %v1158
  %1408 = vmatpush1.bf16.msra.mxu0 %v1157
  %1409 = vmatprep.subr.bf16.mxu0 %v1152
  %1410 = vmatpush1.bf16.msra.mxu0 %v1151
  %1411 = vmatprep.subr.bf16.mxu0 %v1146
  %1412 = vmatpush1.bf16.msra.mxu0 %v1145
  %1413 = vmatprep.subr.bf16.mxu0 %v1236
  %1414 = vmatpush2.bf16.msra.mxu0 %v1235
  %1415 = vmatprep.subr.bf16.mxu0 %v1230
  %1416 = vmatpush2.bf16.msra.mxu0 %v1229
  %1417 = vmatprep.subr.bf16.mxu0 %v1224
  %1418 = vmatpush2.bf16.msra.mxu0 %v1223
  %1419 = vmatprep.subr.bf16.mxu0 %v1218
  %1420 = vmatpush2.bf16.msra.mxu0 %v1217
  %1421 = vmatprep.subr.bf16.mxu0 %v1212
  %1422 = vmatpush2.bf16.msra.mxu0 %v1211
  %1423 = vmatprep.subr.bf16.mxu0 %v1206
  %1424 = vmatpush2.bf16.msra.mxu0 %v1205
  %1425 = vmatprep.subr.bf16.mxu0 %v1200
  %1426 = vmatpush2.bf16.msra.mxu0 %v1199
  %1427 = vmatprep.subr.bf16.mxu0 %v1194
  %1428 = vmatpush2.bf16.msra.mxu0 %v1193
  %1429 = vmatprep.mubr.bf16.mxu0 %v796
  %1430 = vmatmul.mubr.bf16.gmra.mxu0 %v795
  %v1431 = vpop.f32.mrf.mxu0
  %v1432 = vadd.f32 0.0, %v1431
  %v1433 = vpop.f32.mrf.mxu0
  %v1434 = vadd.f32 0.0, %v1433
  %v1435 = vpop.f32.mrf.mxu0
  %v1436 = vadd.f32 0.0, %v1435
  %v1437 = vpop.f32.mrf.mxu0
  %v1438 = vadd.f32 0.0, %v1437
  %1439 = vmatprep.mubr.bf16.mxu0 %v798
  %1440 = vmatmul.mubr.bf16.gmra.mxu0 %v796
  %v1441 = vpop.f32.mrf.mxu0
  %v1442 = vadd.f32 0.0, %v1441
  %v1443 = vpop.f32.mrf.mxu0
  %v1444 = vadd.f32 0.0, %v1443
  %v1445 = vpop.f32.mrf.mxu0
  %v1446 = vadd.f32 0.0, %v1445
  %v1447 = vpop.f32.mrf.mxu0
  %v1448 = vadd.f32 0.0, %v1447
  %1449 = vmatprep.mubr.bf16.mxu0 %v800
  %1450 = vmatmul.mubr.bf16.gmra.mxu0 %v798
  %v1451 = vpop.f32.mrf.mxu0
  %v1452 = vadd.f32 0.0, %v1451
  %v1453 = vpop.f32.mrf.mxu0
  %v1454 = vadd.f32 0.0, %v1453
  %v1455 = vpop.f32.mrf.mxu0
  %v1456 = vadd.f32 0.0, %v1455
  %v1457 = vpop.f32.mrf.mxu0
  %v1458 = vadd.f32 0.0, %v1457
  %1459 = vmatprep.mubr.bf16.mxu0 %v802
  %1460 = vmatmul.mubr.bf16.gmra.mxu0 %v800
  %v1461 = vpop.f32.mrf.mxu0
  %v1462 = vadd.f32 0.0, %v1461
  %v1463 = vpop.f32.mrf.mxu0
  %v1464 = vadd.f32 0.0, %v1463
  %v1465 = vpop.f32.mrf.mxu0
  %v1466 = vadd.f32 0.0, %v1465
  %v1467 = vpop.f32.mrf.mxu0
  %v1468 = vadd.f32 0.0, %v1467
  %1469 = vmatprep.mubr.bf16.mxu0 %v804
  %1470 = vmatmul.mubr.bf16.gmra.mxu0 %v802
  %v1471 = vpop.f32.mrf.mxu0
  %v1472 = vadd.f32 0.0, %v1471
  %v1473 = vpop.f32.mrf.mxu0
  %v1474 = vadd.f32 0.0, %v1473
  %v1475 = vpop.f32.mrf.mxu0
  %v1476 = vadd.f32 0.0, %v1475
  %v1477 = vpop.f32.mrf.mxu0
  %v1478 = vadd.f32 0.0, %v1477
  %1479 = vmatprep.mubr.bf16.mxu0 %v806
  %1480 = vmatmul.mubr.bf16.gmra.mxu0 %v804
  %v1481 = vpop.f32.mrf.mxu0
  %v1482 = vadd.f32 0.0, %v1481
  %v1483 = vpop.f32.mrf.mxu0
  %v1484 = vadd.f32 0.0, %v1483
  %v1485 = vpop.f32.mrf.mxu0
  %v1486 = vadd.f32 0.0, %v1485
  %v1487 = vpop.f32.mrf.mxu0
  %v1488 = vadd.f32 0.0, %v1487
  %1489 = vmatprep.mubr.bf16.mxu0 %v809
  %1490 = vmatmul.mubr.bf16.gmra.mxu0 %v808
  %v1491 = vpop.f32.mrf.mxu0
  %v1492 = vadd.f32 0.0, %v1491
  %v1493 = vpop.f32.mrf.mxu0
  %v1494 = vadd.f32 0.0, %v1493
  %v1495 = vpop.f32.mrf.mxu0
  %v1496 = vadd.f32 0.0, %v1495
  %v1497 = vpop.f32.mrf.mxu0
  %v1498 = vadd.f32 0.0, %v1497
  %1499 = vmatprep.mubr.bf16.mxu0 %v811
  %1500 = vmatmul.mubr.bf16.gmra.mxu0 %v809
  %v1501 = vpop.f32.mrf.mxu0
  %v1502 = vadd.f32 0.0, %v1501
  %v1503 = vpop.f32.mrf.mxu0
  %v1504 = vadd.f32 0.0, %v1503
  %v1505 = vpop.f32.mrf.mxu0
  %v1506 = vadd.f32 0.0, %v1505
  %v1507 = vpop.f32.mrf.mxu0
  %v1508 = vadd.f32 0.0, %v1507
  %1509 = vmatprep.mubr.bf16.mxu0 %v813
  %1510 = vmatmul.mubr.bf16.gmra.mxu0 %v811
  %v1511 = vpop.f32.mrf.mxu0
  %v1512 = vadd.f32 0.0, %v1511
  %v1513 = vpop.f32.mrf.mxu0
  %v1514 = vadd.f32 0.0, %v1513
  %v1515 = vpop.f32.mrf.mxu0
  %v1516 = vadd.f32 0.0, %v1515
  %v1517 = vpop.f32.mrf.mxu0
  %v1518 = vadd.f32 0.0, %v1517
  %1519 = vmatprep.mubr.bf16.mxu0 %v815
  %1520 = vmatmul.mubr.bf16.gmra.mxu0 %v813
  %v1521 = vpop.f32.mrf.mxu0
  %v1522 = vadd.f32 0.0, %v1521
  %v1523 = vpop.f32.mrf.mxu0
  %v1524 = vadd.f32 0.0, %v1523
  %v1525 = vpop.f32.mrf.mxu0
  %v1526 = vadd.f32 0.0, %v1525
  %v1527 = vpop.f32.mrf.mxu0
  %v1528 = vadd.f32 0.0, %v1527
  %1529 = vmatprep.mubr.bf16.mxu0 %v817
  %1530 = vmatmul.mubr.bf16.gmra.mxu0 %v815
  %v1531 = vpop.f32.mrf.mxu0
  %v1532 = vadd.f32 0.0, %v1531
  %v1533 = vpop.f32.mrf.mxu0
  %v1534 = vadd.f32 0.0, %v1533
  %v1535 = vpop.f32.mrf.mxu0
  %v1536 = vadd.f32 0.0, %v1535
  %v1537 = vpop.f32.mrf.mxu0
  %v1538 = vadd.f32 0.0, %v1537
  %1539 = vmatprep.mubr.bf16.mxu0 %v819
  %1540 = vmatmul.mubr.bf16.gmra.mxu0 %v817
  %v1541 = vpop.f32.mrf.mxu0
  %v1542 = vadd.f32 0.0, %v1541
  %v1543 = vpop.f32.mrf.mxu0
  %v1544 = vadd.f32 0.0, %v1543
  %v1545 = vpop.f32.mrf.mxu0
  %v1546 = vadd.f32 0.0, %v1545
  %v1547 = vpop.f32.mrf.mxu0
  %v1548 = vadd.f32 0.0, %v1547
  %1549 = vdwg.mxu0
  %1550 = vmatprep.subr.bf16.mxu0 0
  %1551 = vmatpush1.bf16.msra.mxu0 0
  %1552 = vmatprep.subr.bf16.mxu0 0
  %1553 = vmatpush1.bf16.msra.mxu0 0
  %1554 = vmatprep.subr.bf16.mxu0 0
  %1555 = vmatpush1.bf16.msra.mxu0 0
  %1556 = vmatprep.subr.bf16.mxu0 0
  %1557 = vmatpush1.bf16.msra.mxu0 0
  %1558 = vmatprep.subr.bf16.mxu0 0
  %1559 = vmatpush1.bf16.msra.mxu0 0
  %1560 = vmatprep.subr.bf16.mxu0 0
  %1561 = vmatpush1.bf16.msra.mxu0 0
  %1562 = vmatprep.subr.bf16.mxu0 %v1248
  %1563 = vmatpush1.bf16.msra.mxu0 %v1247
  %1564 = vmatprep.subr.bf16.mxu0 %v1242
  %1565 = vmatpush1.bf16.msra.mxu0 %v1241
  %1566 = vmatprep.subr.bf16.mxu0 0
  %1567 = vmatpush2.bf16.msra.mxu0 0
  %1568 = vmatprep.subr.bf16.mxu0 0
  %1569 = vmatpush2.bf16.msra.mxu0 0
  %1570 = vmatprep.subr.bf16.mxu0 0
  %1571 = vmatpush2.bf16.msra.mxu0 0
  %1572 = vmatprep.subr.bf16.mxu0 0
  %1573 = vmatpush2.bf16.msra.mxu0 0
  %1574 = vmatprep.subr.bf16.mxu0 0
  %1575 = vmatpush2.bf16.msra.mxu0 0
  %1576 = vmatprep.subr.bf16.mxu0 0
  %1577 = vmatpush2.bf16.msra.mxu0 0
  %1578 = vmatprep.subr.bf16.mxu0 0
  %1579 = vmatpush2.bf16.msra.mxu0 0
  %1580 = vmatprep.subr.bf16.mxu0 0
  %1581 = vmatpush2.bf16.msra.mxu0 0
  %1582 = vmatprep.mubr.bf16.mxu0 0
  %1583 = vmatmul.mubr.bf16.gmra.mxu0 %v1362
  %v1584 = vpop.f32.mrf.mxu0
  %v1585 = vadd.f32 %v1432, %v1584
  %v1586 = vpop.f32.mrf.mxu0
  %v1587 = vadd.f32 %v1434, %v1586
  %v1588 = vpop.f32.mrf.mxu0
  %v1589 = vadd.f32 %v1436, %v1588
  %v1590 = vpop.f32.mrf.mxu0
  %v1591 = vadd.f32 %v1438, %v1590
  %1592 = vmatprep.mubr.bf16.mxu0 0
  %1593 = vmatmul.mubr.bf16.gmra.mxu0 %v1365
  %v1594 = vpop.f32.mrf.mxu0
  %v1595 = vadd.f32 %v1442, %v1594
  %v1596 = vpop.f32.mrf.mxu0
  %v1597 = vadd.f32 %v1444, %v1596
  %v1598 = vpop.f32.mrf.mxu0
  %v1599 = vadd.f32 %v1446, %v1598
  %v1600 = vpop.f32.mrf.mxu0
  %v1601 = vadd.f32 %v1448, %v1600
  %1602 = vmatprep.mubr.bf16.mxu0 0
  %1603 = vmatmul.mubr.bf16.gmra.mxu0 %v1368
  %v1604 = vpop.f32.mrf.mxu0
  %v1605 = vadd.f32 %v1452, %v1604
  %v1606 = vpop.f32.mrf.mxu0
  %v1607 = vadd.f32 %v1454, %v1606
  %v1608 = vpop.f32.mrf.mxu0
  %v1609 = vadd.f32 %v1456, %v1608
  %v1610 = vpop.f32.mrf.mxu0
  %v1611 = vadd.f32 %v1458, %v1610
  %1612 = vmatprep.mubr.bf16.mxu0 0
  %1613 = vmatmul.mubr.bf16.gmra.mxu0 %v1371
  %v1614 = vpop.f32.mrf.mxu0
  %v1615 = vadd.f32 %v1462, %v1614
  %v1616 = vpop.f32.mrf.mxu0
  %v1617 = vadd.f32 %v1464, %v1616
  %v1618 = vpop.f32.mrf.mxu0
  %v1619 = vadd.f32 %v1466, %v1618
  %v1620 = vpop.f32.mrf.mxu0
  %v1621 = vadd.f32 %v1468, %v1620
  %1622 = vmatprep.mubr.bf16.mxu0 0
  %1623 = vmatmul.mubr.bf16.gmra.mxu0 %v1374
  %v1624 = vpop.f32.mrf.mxu0
  %v1625 = vadd.f32 %v1472, %v1624
  %v1626 = vpop.f32.mrf.mxu0
  %v1627 = vadd.f32 %v1474, %v1626
  %v1628 = vpop.f32.mrf.mxu0
  %v1629 = vadd.f32 %v1476, %v1628
  %v1630 = vpop.f32.mrf.mxu0
  %v1631 = vadd.f32 %v1478, %v1630
  %1632 = vmatprep.mubr.bf16.mxu0 0
  %1633 = vmatmul.mubr.bf16.gmra.mxu0 %v1377
  %v1634 = vpop.f32.mrf.mxu0
  %v1635 = vadd.f32 %v1482, %v1634
  %v1636 = vpop.f32.mrf.mxu0
  %v1637 = vadd.f32 %v1484, %v1636
  %v1638 = vpop.f32.mrf.mxu0
  %v1639 = vadd.f32 %v1486, %v1638
  %v1640 = vpop.f32.mrf.mxu0
  %v1641 = vadd.f32 %v1488, %v1640
  %1642 = vmatprep.mubr.bf16.mxu0 0
  %1643 = vmatmul.mubr.bf16.gmra.mxu0 %v1380
  %v1644 = vpop.f32.mrf.mxu0
  %v1645 = vadd.f32 %v1492, %v1644
  %v1646 = vpop.f32.mrf.mxu0
  %v1647 = vadd.f32 %v1494, %v1646
  %v1648 = vpop.f32.mrf.mxu0
  %v1649 = vadd.f32 %v1496, %v1648
  %v1650 = vpop.f32.mrf.mxu0
  %v1651 = vadd.f32 %v1498, %v1650
  %1652 = vmatprep.mubr.bf16.mxu0 0
  %1653 = vmatmul.mubr.bf16.gmra.mxu0 %v1383
  %v1654 = vpop.f32.mrf.mxu0
  %v1655 = vadd.f32 %v1502, %v1654
  %v1656 = vpop.f32.mrf.mxu0
  %v1657 = vadd.f32 %v1504, %v1656
  %v1658 = vpop.f32.mrf.mxu0
  %v1659 = vadd.f32 %v1506, %v1658
  %v1660 = vpop.f32.mrf.mxu0
  %v1661 = vadd.f32 %v1508, %v1660
  %1662 = vmatprep.mubr.bf16.mxu0 0
  %1663 = vmatmul.mubr.bf16.gmra.mxu0 %v1386
  %v1664 = vpop.f32.mrf.mxu0
  %v1665 = vadd.f32 %v1512, %v1664
  %v1666 = vpop.f32.mrf.mxu0
  %v1667 = vadd.f32 %v1514, %v1666
  %v1668 = vpop.f32.mrf.mxu0
  %v1669 = vadd.f32 %v1516, %v1668
  %v1670 = vpop.f32.mrf.mxu0
  %v1671 = vadd.f32 %v1518, %v1670
  %1672 = vmatprep.mubr.bf16.mxu0 0
  %1673 = vmatmul.mubr.bf16.gmra.mxu0 %v1389
  %v1674 = vpop.f32.mrf.mxu0
  %v1675 = vadd.f32 %v1522, %v1674
  %v1676 = vpop.f32.mrf.mxu0
  %v1677 = vadd.f32 %v1524, %v1676
  %v1678 = vpop.f32.mrf.mxu0
  %v1679 = vadd.f32 %v1526, %v1678
  %v1680 = vpop.f32.mrf.mxu0
  %v1681 = vadd.f32 %v1528, %v1680
  %1682 = vmatprep.mubr.bf16.mxu0 0
  %1683 = vmatmul.mubr.bf16.gmra.mxu0 %v1392
  %v1684 = vpop.f32.mrf.mxu0
  %v1685 = vadd.f32 %v1532, %v1684
  %v1686 = vpop.f32.mrf.mxu0
  %v1687 = vadd.f32 %v1534, %v1686
  %v1688 = vpop.f32.mrf.mxu0
  %v1689 = vadd.f32 %v1536, %v1688
  %v1690 = vpop.f32.mrf.mxu0
  %v1691 = vadd.f32 %v1538, %v1690
  %1692 = vmatprep.mubr.bf16.mxu0 0
  %1693 = vmatmul.mubr.bf16.gmra.mxu0 %v1395
  %v1694 = vpop.f32.mrf.mxu0
  %v1695 = vadd.f32 %v1542, %v1694
  %v1696 = vpop.f32.mrf.mxu0
  %v1697 = vadd.f32 %v1544, %v1696
  %v1698 = vpop.f32.mrf.mxu0
  %v1699 = vadd.f32 %v1546, %v1698
  %v1700 = vpop.f32.mrf.mxu0
  %v1701 = vadd.f32 %v1548, %v1700
  %1702 = vdwg.mxu0
  %1703 = vmatprep.subr.bf16.mxu0 %v1190
  %1704 = vmatpush1.bf16.msra.mxu0 %v1189
  %1705 = vmatprep.subr.bf16.mxu0 %v1184
  %1706 = vmatpush1.bf16.msra.mxu0 %v1183
  %1707 = vmatprep.subr.bf16.mxu0 %v1178
  %1708 = vmatpush1.bf16.msra.mxu0 %v1177
  %1709 = vmatprep.subr.bf16.mxu0 %v1172
  %1710 = vmatpush1.bf16.msra.mxu0 %v1171
  %1711 = vmatprep.subr.bf16.mxu0 %v1166
  %1712 = vmatpush1.bf16.msra.mxu0 %v1165
  %1713 = vmatprep.subr.bf16.mxu0 %v1160
  %1714 = vmatpush1.bf16.msra.mxu0 %v1159
  %1715 = vmatprep.subr.bf16.mxu0 %v1154
  %1716 = vmatpush1.bf16.msra.mxu0 %v1153
  %1717 = vmatprep.subr.bf16.mxu0 %v1148
  %1718 = vmatpush1.bf16.msra.mxu0 %v1147
  %1719 = vmatprep.subr.bf16.mxu0 %v1238
  %1720 = vmatpush2.bf16.msra.mxu0 %v1237
  %1721 = vmatprep.subr.bf16.mxu0 %v1232
  %1722 = vmatpush2.bf16.msra.mxu0 %v1231
  %1723 = vmatprep.subr.bf16.mxu0 %v1226
  %1724 = vmatpush2.bf16.msra.mxu0 %v1225
  %1725 = vmatprep.subr.bf16.mxu0 %v1220
  %1726 = vmatpush2.bf16.msra.mxu0 %v1219
  %1727 = vmatprep.subr.bf16.mxu0 %v1214
  %1728 = vmatpush2.bf16.msra.mxu0 %v1213
  %1729 = vmatprep.subr.bf16.mxu0 %v1208
  %1730 = vmatpush2.bf16.msra.mxu0 %v1207
  %1731 = vmatprep.subr.bf16.mxu0 %v1202
  %1732 = vmatpush2.bf16.msra.mxu0 %v1201
  %1733 = vmatprep.subr.bf16.mxu0 %v1196
  %1734 = vmatpush2.bf16.msra.mxu0 %v1195
  %1735 = vmatprep.mubr.bf16.mxu0 %v796
  %1736 = vmatmul.mubr.bf16.gmra.mxu0 %v795
  %v1737 = vpop.f32.mrf.mxu0
  %v1738 = vadd.f32 0.0, %v1737
  %v1739 = vpop.f32.mrf.mxu0
  %v1740 = vadd.f32 0.0, %v1739
  %v1741 = vpop.f32.mrf.mxu0
  %v1742 = vadd.f32 0.0, %v1741
  %v1743 = vpop.f32.mrf.mxu0
  %v1744 = vadd.f32 0.0, %v1743
  %1745 = vmatprep.mubr.bf16.mxu0 %v798
  %1746 = vmatmul.mubr.bf16.gmra.mxu0 %v796
  %v1747 = vpop.f32.mrf.mxu0
  %v1748 = vadd.f32 0.0, %v1747
  %v1749 = vpop.f32.mrf.mxu0
  %v1750 = vadd.f32 0.0, %v1749
  %v1751 = vpop.f32.mrf.mxu0
  %v1752 = vadd.f32 0.0, %v1751
  %v1753 = vpop.f32.mrf.mxu0
  %v1754 = vadd.f32 0.0, %v1753
  %1755 = vmatprep.mubr.bf16.mxu0 %v800
  %1756 = vmatmul.mubr.bf16.gmra.mxu0 %v798
  %v1757 = vpop.f32.mrf.mxu0
  %v1758 = vadd.f32 0.0, %v1757
  %v1759 = vpop.f32.mrf.mxu0
  %v1760 = vadd.f32 0.0, %v1759
  %v1761 = vpop.f32.mrf.mxu0
  %v1762 = vadd.f32 0.0, %v1761
  %v1763 = vpop.f32.mrf.mxu0
  %v1764 = vadd.f32 0.0, %v1763
  %1765 = vmatprep.mubr.bf16.mxu0 %v802
  %1766 = vmatmul.mubr.bf16.gmra.mxu0 %v800
  %v1767 = vpop.f32.mrf.mxu0
  %v1768 = vadd.f32 0.0, %v1767
  %v1769 = vpop.f32.mrf.mxu0
  %v1770 = vadd.f32 0.0, %v1769
  %v1771 = vpop.f32.mrf.mxu0
  %v1772 = vadd.f32 0.0, %v1771
  %v1773 = vpop.f32.mrf.mxu0
  %v1774 = vadd.f32 0.0, %v1773
  %1775 = vmatprep.mubr.bf16.mxu0 %v804
  %1776 = vmatmul.mubr.bf16.gmra.mxu0 %v802
  %v1777 = vpop.f32.mrf.mxu0
  %v1778 = vadd.f32 0.0, %v1777
  %v1779 = vpop.f32.mrf.mxu0
  %v1780 = vadd.f32 0.0, %v1779
  %v1781 = vpop.f32.mrf.mxu0
  %v1782 = vadd.f32 0.0, %v1781
  %v1783 = vpop.f32.mrf.mxu0
  %v1784 = vadd.f32 0.0, %v1783
  %1785 = vmatprep.mubr.bf16.mxu0 %v806
  %1786 = vmatmul.mubr.bf16.gmra.mxu0 %v804
  %v1787 = vpop.f32.mrf.mxu0
  %v1788 = vadd.f32 0.0, %v1787
  %v1789 = vpop.f32.mrf.mxu0
  %v1790 = vadd.f32 0.0, %v1789
  %v1791 = vpop.f32.mrf.mxu0
  %v1792 = vadd.f32 0.0, %v1791
  %v1793 = vpop.f32.mrf.mxu0
  %v1794 = vadd.f32 0.0, %v1793
  %1795 = vmatprep.mubr.bf16.mxu0 %v809
  %1796 = vmatmul.mubr.bf16.gmra.mxu0 %v808
  %v1797 = vpop.f32.mrf.mxu0
  %v1798 = vadd.f32 0.0, %v1797
  %v1799 = vpop.f32.mrf.mxu0
  %v1800 = vadd.f32 0.0, %v1799
  %v1801 = vpop.f32.mrf.mxu0
  %v1802 = vadd.f32 0.0, %v1801
  %v1803 = vpop.f32.mrf.mxu0
  %v1804 = vadd.f32 0.0, %v1803
  %1805 = vmatprep.mubr.bf16.mxu0 %v811
  %1806 = vmatmul.mubr.bf16.gmra.mxu0 %v809
  %v1807 = vpop.f32.mrf.mxu0
  %v1808 = vadd.f32 0.0, %v1807
  %v1809 = vpop.f32.mrf.mxu0
  %v1810 = vadd.f32 0.0, %v1809
  %v1811 = vpop.f32.mrf.mxu0
  %v1812 = vadd.f32 0.0, %v1811
  %v1813 = vpop.f32.mrf.mxu0
  %v1814 = vadd.f32 0.0, %v1813
  %1815 = vmatprep.mubr.bf16.mxu0 %v813
  %1816 = vmatmul.mubr.bf16.gmra.mxu0 %v811
  %v1817 = vpop.f32.mrf.mxu0
  %v1818 = vadd.f32 0.0, %v1817
  %v1819 = vpop.f32.mrf.mxu0
  %v1820 = vadd.f32 0.0, %v1819
  %v1821 = vpop.f32.mrf.mxu0
  %v1822 = vadd.f32 0.0, %v1821
  %v1823 = vpop.f32.mrf.mxu0
  %v1824 = vadd.f32 0.0, %v1823
  %1825 = vmatprep.mubr.bf16.mxu0 %v815
  %1826 = vmatmul.mubr.bf16.gmra.mxu0 %v813
  %v1827 = vpop.f32.mrf.mxu0
  %v1828 = vadd.f32 0.0, %v1827
  %v1829 = vpop.f32.mrf.mxu0
  %v1830 = vadd.f32 0.0, %v1829
  %v1831 = vpop.f32.mrf.mxu0
  %v1832 = vadd.f32 0.0, %v1831
  %v1833 = vpop.f32.mrf.mxu0
  %v1834 = vadd.f32 0.0, %v1833
  %1835 = vmatprep.mubr.bf16.mxu0 %v817
  %1836 = vmatmul.mubr.bf16.gmra.mxu0 %v815
  %v1837 = vpop.f32.mrf.mxu0
  %v1838 = vadd.f32 0.0, %v1837
  %v1839 = vpop.f32.mrf.mxu0
  %v1840 = vadd.f32 0.0, %v1839
  %v1841 = vpop.f32.mrf.mxu0
  %v1842 = vadd.f32 0.0, %v1841
  %v1843 = vpop.f32.mrf.mxu0
  %v1844 = vadd.f32 0.0, %v1843
  %1845 = vmatprep.mubr.bf16.mxu0 %v819
  %1846 = vmatmul.mubr.bf16.gmra.mxu0 %v817
  %v1847 = vpop.f32.mrf.mxu0
  %v1848 = vadd.f32 0.0, %v1847
  %v1849 = vpop.f32.mrf.mxu0
  %v1850 = vadd.f32 0.0, %v1849
  %v1851 = vpop.f32.mrf.mxu0
  %v1852 = vadd.f32 0.0, %v1851
  %v1853 = vpop.f32.mrf.mxu0
  %v1854 = vadd.f32 0.0, %v1853
  %1855 = vdwg.mxu0
  %1856 = vmatprep.subr.bf16.mxu0 0
  %1857 = vmatpush1.bf16.msra.mxu0 0
  %1858 = vmatprep.subr.bf16.mxu0 0
  %1859 = vmatpush1.bf16.msra.mxu0 0
  %1860 = vmatprep.subr.bf16.mxu0 0
  %1861 = vmatpush1.bf16.msra.mxu0 0
  %1862 = vmatprep.subr.bf16.mxu0 0
  %1863 = vmatpush1.bf16.msra.mxu0 0
  %1864 = vmatprep.subr.bf16.mxu0 0
  %1865 = vmatpush1.bf16.msra.mxu0 0
  %1866 = vmatprep.subr.bf16.mxu0 0
  %1867 = vmatpush1.bf16.msra.mxu0 0
  %1868 = vmatprep.subr.bf16.mxu0 %v1250
  %1869 = vmatpush1.bf16.msra.mxu0 %v1249
  %1870 = vmatprep.subr.bf16.mxu0 %v1244
  %1871 = vmatpush1.bf16.msra.mxu0 %v1243
  %1872 = vmatprep.subr.bf16.mxu0 0
  %1873 = vmatpush2.bf16.msra.mxu0 0
  %1874 = vmatprep.subr.bf16.mxu0 0
  %1875 = vmatpush2.bf16.msra.mxu0 0
  %1876 = vmatprep.subr.bf16.mxu0 0
  %1877 = vmatpush2.bf16.msra.mxu0 0
  %1878 = vmatprep.subr.bf16.mxu0 0
  %1879 = vmatpush2.bf16.msra.mxu0 0
  %1880 = vmatprep.subr.bf16.mxu0 0
  %1881 = vmatpush2.bf16.msra.mxu0 0
  %1882 = vmatprep.subr.bf16.mxu0 0
  %1883 = vmatpush2.bf16.msra.mxu0 0
  %1884 = vmatprep.subr.bf16.mxu0 0
  %1885 = vmatpush2.bf16.msra.mxu0 0
  %1886 = vmatprep.subr.bf16.mxu0 0
  %1887 = vmatpush2.bf16.msra.mxu0 0
  %1888 = vmatprep.mubr.bf16.mxu0 0
  %1889 = vmatmul.mubr.bf16.gmra.mxu0 %v1362
  %v1890 = vpop.f32.mrf.mxu0
  %v1891 = vadd.f32 %v1738, %v1890
  %v1892 = vpop.f32.mrf.mxu0
  %v1893 = vadd.f32 %v1740, %v1892
  %v1894 = vpop.f32.mrf.mxu0
  %v1895 = vadd.f32 %v1742, %v1894
  %v1896 = vpop.f32.mrf.mxu0
  %v1897 = vadd.f32 %v1744, %v1896
  %1898 = vmatprep.mubr.bf16.mxu0 0
  %1899 = vmatmul.mubr.bf16.gmra.mxu0 %v1365
  %v1900 = vpop.f32.mrf.mxu0
  %v1901 = vadd.f32 %v1748, %v1900
  %v1902 = vpop.f32.mrf.mxu0
  %v1903 = vadd.f32 %v1750, %v1902
  %v1904 = vpop.f32.mrf.mxu0
  %v1905 = vadd.f32 %v1752, %v1904
  %v1906 = vpop.f32.mrf.mxu0
  %v1907 = vadd.f32 %v1754, %v1906
  %1908 = vmatprep.mubr.bf16.mxu0 0
  %1909 = vmatmul.mubr.bf16.gmra.mxu0 %v1368
  %v1910 = vpop.f32.mrf.mxu0
  %v1911 = vadd.f32 %v1758, %v1910
  %v1912 = vpop.f32.mrf.mxu0
  %v1913 = vadd.f32 %v1760, %v1912
  %v1914 = vpop.f32.mrf.mxu0
  %v1915 = vadd.f32 %v1762, %v1914
  %v1916 = vpop.f32.mrf.mxu0
  %v1917 = vadd.f32 %v1764, %v1916
  %1918 = vmatprep.mubr.bf16.mxu0 0
  %1919 = vmatmul.mubr.bf16.gmra.mxu0 %v1371
  %v1920 = vpop.f32.mrf.mxu0
  %v1921 = vadd.f32 %v1768, %v1920
  %v1922 = vpop.f32.mrf.mxu0
  %v1923 = vadd.f32 %v1770, %v1922
  %v1924 = vpop.f32.mrf.mxu0
  %v1925 = vadd.f32 %v1772, %v1924
  %v1926 = vpop.f32.mrf.mxu0
  %v1927 = vadd.f32 %v1774, %v1926
  %1928 = vmatprep.mubr.bf16.mxu0 0
  %1929 = vmatmul.mubr.bf16.gmra.mxu0 %v1374
  %v1930 = vpop.f32.mrf.mxu0
  %v1931 = vadd.f32 %v1778, %v1930
  %v1932 = vpop.f32.mrf.mxu0
  %v1933 = vadd.f32 %v1780, %v1932
  %v1934 = vpop.f32.mrf.mxu0
  %v1935 = vadd.f32 %v1782, %v1934
  %v1936 = vpop.f32.mrf.mxu0
  %v1937 = vadd.f32 %v1784, %v1936
  %1938 = vmatprep.mubr.bf16.mxu0 0
  %1939 = vmatmul.mubr.bf16.gmra.mxu0 %v1377
  %v1940 = vpop.f32.mrf.mxu0
  %v1941 = vadd.f32 %v1788, %v1940
  %v1942 = vpop.f32.mrf.mxu0
  %v1943 = vadd.f32 %v1790, %v1942
  %v1944 = vpop.f32.mrf.mxu0
  %v1945 = vadd.f32 %v1792, %v1944
  %v1946 = vpop.f32.mrf.mxu0
  %v1947 = vadd.f32 %v1794, %v1946
  %1948 = vmatprep.mubr.bf16.mxu0 0
  %1949 = vmatmul.mubr.bf16.gmra.mxu0 %v1380
  %v1950 = vpop.f32.mrf.mxu0
  %v1951 = vadd.f32 %v1798, %v1950
  %v1952 = vpop.f32.mrf.mxu0
  %v1953 = vadd.f32 %v1800, %v1952
  %v1954 = vpop.f32.mrf.mxu0
  %v1955 = vadd.f32 %v1802, %v1954
  %v1956 = vpop.f32.mrf.mxu0
  %v1957 = vadd.f32 %v1804, %v1956
  %1958 = vmatprep.mubr.bf16.mxu0 0
  %1959 = vmatmul.mubr.bf16.gmra.mxu0 %v1383
  %v1960 = vpop.f32.mrf.mxu0
  %v1961 = vadd.f32 %v1808, %v1960
  %v1962 = vpop.f32.mrf.mxu0
  %v1963 = vadd.f32 %v1810, %v1962
  %v1964 = vpop.f32.mrf.mxu0
  %v1965 = vadd.f32 %v1812, %v1964
  %v1966 = vpop.f32.mrf.mxu0
  %v1967 = vadd.f32 %v1814, %v1966
  %1968 = vmatprep.mubr.bf16.mxu0 0
  %1969 = vmatmul.mubr.bf16.gmra.mxu0 %v1386
  %v1970 = vpop.f32.mrf.mxu0
  %v1971 = vadd.f32 %v1818, %v1970
  %v1972 = vpop.f32.mrf.mxu0
  %v1973 = vadd.f32 %v1820, %v1972
  %v1974 = vpop.f32.mrf.mxu0
  %v1975 = vadd.f32 %v1822, %v1974
  %v1976 = vpop.f32.mrf.mxu0
  %v1977 = vadd.f32 %v1824, %v1976
  %1978 = vmatprep.mubr.bf16.mxu0 0
  %1979 = vmatmul.mubr.bf16.gmra.mxu0 %v1389
  %v1980 = vpop.f32.mrf.mxu0
  %v1981 = vadd.f32 %v1828, %v1980
  %v1982 = vpop.f32.mrf.mxu0
  %v1983 = vadd.f32 %v1830, %v1982
  %v1984 = vpop.f32.mrf.mxu0
  %v1985 = vadd.f32 %v1832, %v1984
  %v1986 = vpop.f32.mrf.mxu0
  %v1987 = vadd.f32 %v1834, %v1986
  %1988 = vmatprep.mubr.bf16.mxu0 0
  %1989 = vmatmul.mubr.bf16.gmra.mxu0 %v1392
  %v1990 = vpop.f32.mrf.mxu0
  %v1991 = vadd.f32 %v1838, %v1990
  %v1992 = vpop.f32.mrf.mxu0
  %v1993 = vadd.f32 %v1840, %v1992
  %v1994 = vpop.f32.mrf.mxu0
  %v1995 = vadd.f32 %v1842, %v1994
  %v1996 = vpop.f32.mrf.mxu0
  %v1997 = vadd.f32 %v1844, %v1996
  %1998 = vmatprep.mubr.bf16.mxu0 0
  %1999 = vmatmul.mubr.bf16.gmra.mxu0 %v1395
  %v2000 = vpop.f32.mrf.mxu0
  %v2001 = vadd.f32 %v1848, %v2000
  %v2002 = vpop.f32.mrf.mxu0
  %v2003 = vadd.f32 %v1850, %v2002
  %v2004 = vpop.f32.mrf.mxu0
  %v2005 = vadd.f32 %v1852, %v2004
  %v2006 = vpop.f32.mrf.mxu0
  %v2007 = vadd.f32 %v1854, %v2006
  %2008 = vdwg.mxu0
  %2009 = vmatprep.subr.bf16.mxu0 %v1192
  %2010 = vmatpush1.bf16.msra.mxu0 %v1191
  %2011 = vmatprep.subr.bf16.mxu0 %v1186
  %2012 = vmatpush1.bf16.msra.mxu0 %v1185
  %2013 = vmatprep.subr.bf16.mxu0 %v1180
  %2014 = vmatpush1.bf16.msra.mxu0 %v1179
  %2015 = vmatprep.subr.bf16.mxu0 %v1174
  %2016 = vmatpush1.bf16.msra.mxu0 %v1173
  %2017 = vmatprep.subr.bf16.mxu0 %v1168
  %2018 = vmatpush1.bf16.msra.mxu0 %v1167
  %2019 = vmatprep.subr.bf16.mxu0 %v1162
  %2020 = vmatpush1.bf16.msra.mxu0 %v1161
  %2021 = vmatprep.subr.bf16.mxu0 %v1156
  %2022 = vmatpush1.bf16.msra.mxu0 %v1155
  %2023 = vmatprep.subr.bf16.mxu0 %v1150
  %2024 = vmatpush1.bf16.msra.mxu0 %v1149
  %2025 = vmatprep.subr.bf16.mxu0 %v1240
  %2026 = vmatpush2.bf16.msra.mxu0 %v1239
  %2027 = vmatprep.subr.bf16.mxu0 %v1234
  %2028 = vmatpush2.bf16.msra.mxu0 %v1233
  %2029 = vmatprep.subr.bf16.mxu0 %v1228
  %2030 = vmatpush2.bf16.msra.mxu0 %v1227
  %2031 = vmatprep.subr.bf16.mxu0 %v1222
  %2032 = vmatpush2.bf16.msra.mxu0 %v1221
  %2033 = vmatprep.subr.bf16.mxu0 %v1216
  %2034 = vmatpush2.bf16.msra.mxu0 %v1215
  %2035 = vmatprep.subr.bf16.mxu0 %v1210
  %2036 = vmatpush2.bf16.msra.mxu0 %v1209
  %2037 = vmatprep.subr.bf16.mxu0 %v1204
  %2038 = vmatpush2.bf16.msra.mxu0 %v1203
  %2039 = vmatprep.subr.bf16.mxu0 %v1198
  %2040 = vmatpush2.bf16.msra.mxu0 %v1197
  %2041 = vmatprep.mubr.bf16.mxu0 %v796
  %2042 = vmatmul.mubr.bf16.gmra.mxu0 %v795
  %v2043 = vpop.f32.mrf.mxu0
  %v2044 = vadd.f32 0.0, %v2043
  %v2045 = vpop.f32.mrf.mxu0
  %v2046 = vadd.f32 0.0, %v2045
  %v2047 = vpop.f32.mrf.mxu0
  %v2048 = vadd.f32 0.0, %v2047
  %v2049 = vpop.f32.mrf.mxu0
  %v2050 = vadd.f32 0.0, %v2049
  %2051 = vmatprep.mubr.bf16.mxu0 %v798
  %2052 = vmatmul.mubr.bf16.gmra.mxu0 %v796
  %v2053 = vpop.f32.mrf.mxu0
  %v2054 = vadd.f32 0.0, %v2053
  %v2055 = vpop.f32.mrf.mxu0
  %v2056 = vadd.f32 0.0, %v2055
  %v2057 = vpop.f32.mrf.mxu0
  %v2058 = vadd.f32 0.0, %v2057
  %v2059 = vpop.f32.mrf.mxu0
  %v2060 = vadd.f32 0.0, %v2059
  %2061 = vmatprep.mubr.bf16.mxu0 %v800
  %2062 = vmatmul.mubr.bf16.gmra.mxu0 %v798
  %v2063 = vpop.f32.mrf.mxu0
  %v2064 = vadd.f32 0.0, %v2063
  %v2065 = vpop.f32.mrf.mxu0
  %v2066 = vadd.f32 0.0, %v2065
  %v2067 = vpop.f32.mrf.mxu0
  %v2068 = vadd.f32 0.0, %v2067
  %v2069 = vpop.f32.mrf.mxu0
  %v2070 = vadd.f32 0.0, %v2069
  %2071 = vmatprep.mubr.bf16.mxu0 %v802
  %2072 = vmatmul.mubr.bf16.gmra.mxu0 %v800
  %v2073 = vpop.f32.mrf.mxu0
  %v2074 = vadd.f32 0.0, %v2073
  %v2075 = vpop.f32.mrf.mxu0
  %v2076 = vadd.f32 0.0, %v2075
  %v2077 = vpop.f32.mrf.mxu0
  %v2078 = vadd.f32 0.0, %v2077
  %v2079 = vpop.f32.mrf.mxu0
  %v2080 = vadd.f32 0.0, %v2079
  %2081 = vmatprep.mubr.bf16.mxu0 %v804
  %2082 = vmatmul.mubr.bf16.gmra.mxu0 %v802
  %v2083 = vpop.f32.mrf.mxu0
  %v2084 = vadd.f32 0.0, %v2083
  %v2085 = vpop.f32.mrf.mxu0
  %v2086 = vadd.f32 0.0, %v2085
  %v2087 = vpop.f32.mrf.mxu0
  %v2088 = vadd.f32 0.0, %v2087
  %v2089 = vpop.f32.mrf.mxu0
  %v2090 = vadd.f32 0.0, %v2089
  %2091 = vmatprep.mubr.bf16.mxu0 %v806
  %2092 = vmatmul.mubr.bf16.gmra.mxu0 %v804
  %v2093 = vpop.f32.mrf.mxu0
  %v2094 = vadd.f32 0.0, %v2093
  %v2095 = vpop.f32.mrf.mxu0
  %v2096 = vadd.f32 0.0, %v2095
  %v2097 = vpop.f32.mrf.mxu0
  %v2098 = vadd.f32 0.0, %v2097
  %v2099 = vpop.f32.mrf.mxu0
  %v2100 = vadd.f32 0.0, %v2099
  %2101 = vmatprep.mubr.bf16.mxu0 %v809
  %2102 = vmatmul.mubr.bf16.gmra.mxu0 %v808
  %v2103 = vpop.f32.mrf.mxu0
  %v2104 = vadd.f32 0.0, %v2103
  %v2105 = vpop.f32.mrf.mxu0
  %v2106 = vadd.f32 0.0, %v2105
  %v2107 = vpop.f32.mrf.mxu0
  %v2108 = vadd.f32 0.0, %v2107
  %v2109 = vpop.f32.mrf.mxu0
  %v2110 = vadd.f32 0.0, %v2109
  %2111 = vmatprep.mubr.bf16.mxu0 %v811
  %2112 = vmatmul.mubr.bf16.gmra.mxu0 %v809
  %v2113 = vpop.f32.mrf.mxu0
  %v2114 = vadd.f32 0.0, %v2113
  %v2115 = vpop.f32.mrf.mxu0
  %v2116 = vadd.f32 0.0, %v2115
  %v2117 = vpop.f32.mrf.mxu0
  %v2118 = vadd.f32 0.0, %v2117
  %v2119 = vpop.f32.mrf.mxu0
  %v2120 = vadd.f32 0.0, %v2119
  %2121 = vmatprep.mubr.bf16.mxu0 %v813
  %2122 = vmatmul.mubr.bf16.gmra.mxu0 %v811
  %v2123 = vpop.f32.mrf.mxu0
  %v2124 = vadd.f32 0.0, %v2123
  %v2125 = vpop.f32.mrf.mxu0
  %v2126 = vadd.f32 0.0, %v2125
  %v2127 = vpop.f32.mrf.mxu0
  %v2128 = vadd.f32 0.0, %v2127
  %v2129 = vpop.f32.mrf.mxu0
  %v2130 = vadd.f32 0.0, %v2129
  %2131 = vmatprep.mubr.bf16.mxu0 %v815
  %2132 = vmatmul.mubr.bf16.gmra.mxu0 %v813
  %v2133 = vpop.f32.mrf.mxu0
  %v2134 = vadd.f32 0.0, %v2133
  %v2135 = vpop.f32.mrf.mxu0
  %v2136 = vadd.f32 0.0, %v2135
  %v2137 = vpop.f32.mrf.mxu0
  %v2138 = vadd.f32 0.0, %v2137
  %v2139 = vpop.f32.mrf.mxu0
  %v2140 = vadd.f32 0.0, %v2139
  %2141 = vmatprep.mubr.bf16.mxu0 %v817
  %2142 = vmatmul.mubr.bf16.gmra.mxu0 %v815
  %v2143 = vpop.f32.mrf.mxu0
  %v2144 = vadd.f32 0.0, %v2143
  %v2145 = vpop.f32.mrf.mxu0
  %v2146 = vadd.f32 0.0, %v2145
  %v2147 = vpop.f32.mrf.mxu0
  %v2148 = vadd.f32 0.0, %v2147
  %v2149 = vpop.f32.mrf.mxu0
  %v2150 = vadd.f32 0.0, %v2149
  %2151 = vmatprep.mubr.bf16.mxu0 %v819
  %2152 = vmatmul.mubr.bf16.gmra.mxu0 %v817
  %v2153 = vpop.f32.mrf.mxu0
  %v2154 = vadd.f32 0.0, %v2153
  %v2155 = vpop.f32.mrf.mxu0
  %v2156 = vadd.f32 0.0, %v2155
  %v2157 = vpop.f32.mrf.mxu0
  %v2158 = vadd.f32 0.0, %v2157
  %v2159 = vpop.f32.mrf.mxu0
  %v2160 = vadd.f32 0.0, %v2159
  %2161 = vdwg.mxu0
  %2162 = vmatprep.subr.bf16.mxu0 0
  %2163 = vmatpush1.bf16.msra.mxu0 0
  %2164 = vmatprep.subr.bf16.mxu0 0
  %2165 = vmatpush1.bf16.msra.mxu0 0
  %2166 = vmatprep.subr.bf16.mxu0 0
  %2167 = vmatpush1.bf16.msra.mxu0 0
  %2168 = vmatprep.subr.bf16.mxu0 0
  %2169 = vmatpush1.bf16.msra.mxu0 0
  %2170 = vmatprep.subr.bf16.mxu0 0
  %2171 = vmatpush1.bf16.msra.mxu0 0
  %2172 = vmatprep.subr.bf16.mxu0 0
  %2173 = vmatpush1.bf16.msra.mxu0 0
  %2174 = vmatprep.subr.bf16.mxu0 %v1252
  %2175 = vmatpush1.bf16.msra.mxu0 %v1251
  %2176 = vmatprep.subr.bf16.mxu0 %v1246
  %2177 = vmatpush1.bf16.msra.mxu0 %v1245
  %2178 = vmatprep.subr.bf16.mxu0 0
  %2179 = vmatpush2.bf16.msra.mxu0 0
  %2180 = vmatprep.subr.bf16.mxu0 0
  %2181 = vmatpush2.bf16.msra.mxu0 0
  %2182 = vmatprep.subr.bf16.mxu0 0
  %2183 = vmatpush2.bf16.msra.mxu0 0
  %2184 = vmatprep.subr.bf16.mxu0 0
  %2185 = vmatpush2.bf16.msra.mxu0 0
  %2186 = vmatprep.subr.bf16.mxu0 0
  %2187 = vmatpush2.bf16.msra.mxu0 0
  %2188 = vmatprep.subr.bf16.mxu0 0
  %2189 = vmatpush2.bf16.msra.mxu0 0
  %2190 = vmatprep.subr.bf16.mxu0 0
  %2191 = vmatpush2.bf16.msra.mxu0 0
  %2192 = vmatprep.subr.bf16.mxu0 0
  %2193 = vmatpush2.bf16.msra.mxu0 0
  %2194 = vmatprep.mubr.bf16.mxu0 0
  %2195 = vmatmul.mubr.bf16.gmra.mxu0 %v1362
  %v2196 = vpop.f32.mrf.mxu0
  %v2197 = vadd.f32 %v2044, %v2196
  %v2198 = vpop.f32.mrf.mxu0
  %v2199 = vadd.f32 %v2046, %v2198
  %v2200 = vpop.f32.mrf.mxu0
  %v2201 = vadd.f32 %v2048, %v2200
  %v2202 = vpop.f32.mrf.mxu0
  %v2203 = vadd.f32 %v2050, %v2202
  %2204 = vmatprep.mubr.bf16.mxu0 0
  %2205 = vmatmul.mubr.bf16.gmra.mxu0 %v1365
  %v2206 = vpop.f32.mrf.mxu0
  %v2207 = vadd.f32 %v2054, %v2206
  %v2208 = vpop.f32.mrf.mxu0
  %v2209 = vadd.f32 %v2056, %v2208
  %v2210 = vpop.f32.mrf.mxu0
  %v2211 = vadd.f32 %v2058, %v2210
  %v2212 = vpop.f32.mrf.mxu0
  %v2213 = vadd.f32 %v2060, %v2212
  %2214 = vmatprep.mubr.bf16.mxu0 0
  %2215 = vmatmul.mubr.bf16.gmra.mxu0 %v1368
  %v2216 = vpop.f32.mrf.mxu0
  %v2217 = vadd.f32 %v2064, %v2216
  %v2218 = vpop.f32.mrf.mxu0
  %v2219 = vadd.f32 %v2066, %v2218
  %v2220 = vpop.f32.mrf.mxu0
  %v2221 = vadd.f32 %v2068, %v2220
  %v2222 = vpop.f32.mrf.mxu0
  %v2223 = vadd.f32 %v2070, %v2222
  %2224 = vmatprep.mubr.bf16.mxu0 0
  %2225 = vmatmul.mubr.bf16.gmra.mxu0 %v1371
  %v2226 = vpop.f32.mrf.mxu0
  %v2227 = vadd.f32 %v2074, %v2226
  %v2228 = vpop.f32.mrf.mxu0
  %v2229 = vadd.f32 %v2076, %v2228
  %v2230 = vpop.f32.mrf.mxu0
  %v2231 = vadd.f32 %v2078, %v2230
  %v2232 = vpop.f32.mrf.mxu0
  %v2233 = vadd.f32 %v2080, %v2232
  %2234 = vmatprep.mubr.bf16.mxu0 0
  %2235 = vmatmul.mubr.bf16.gmra.mxu0 %v1374
  %v2236 = vpop.f32.mrf.mxu0
  %v2237 = vadd.f32 %v2084, %v2236
  %v2238 = vpop.f32.mrf.mxu0
  %v2239 = vadd.f32 %v2086, %v2238
  %v2240 = vpop.f32.mrf.mxu0
  %v2241 = vadd.f32 %v2088, %v2240
  %v2242 = vpop.f32.mrf.mxu0
  %v2243 = vadd.f32 %v2090, %v2242
  %2244 = vmatprep.mubr.bf16.mxu0 0
  %2245 = vmatmul.mubr.bf16.gmra.mxu0 %v1377
  %v2246 = vpop.f32.mrf.mxu0
  %v2247 = vadd.f32 %v2094, %v2246
  %v2248 = vpop.f32.mrf.mxu0
  %v2249 = vadd.f32 %v2096, %v2248
  %v2250 = vpop.f32.mrf.mxu0
  %v2251 = vadd.f32 %v2098, %v2250
  %v2252 = vpop.f32.mrf.mxu0
  %v2253 = vadd.f32 %v2100, %v2252
  %2254 = vmatprep.mubr.bf16.mxu0 0
  %2255 = vmatmul.mubr.bf16.gmra.mxu0 %v1380
  %v2256 = vpop.f32.mrf.mxu0
  %v2257 = vadd.f32 %v2104, %v2256
  %v2258 = vpop.f32.mrf.mxu0
  %v2259 = vadd.f32 %v2106, %v2258
  %v2260 = vpop.f32.mrf.mxu0
  %v2261 = vadd.f32 %v2108, %v2260
  %v2262 = vpop.f32.mrf.mxu0
  %v2263 = vadd.f32 %v2110, %v2262
  %2264 = vmatprep.mubr.bf16.mxu0 0
  %2265 = vmatmul.mubr.bf16.gmra.mxu0 %v1383
  %v2266 = vpop.f32.mrf.mxu0
  %v2267 = vadd.f32 %v2114, %v2266
  %v2268 = vpop.f32.mrf.mxu0
  %v2269 = vadd.f32 %v2116, %v2268
  %v2270 = vpop.f32.mrf.mxu0
  %v2271 = vadd.f32 %v2118, %v2270
  %v2272 = vpop.f32.mrf.mxu0
  %v2273 = vadd.f32 %v2120, %v2272
  %2274 = vmatprep.mubr.bf16.mxu0 0
  %2275 = vmatmul.mubr.bf16.gmra.mxu0 %v1386
  %v2276 = vpop.f32.mrf.mxu0
  %v2277 = vadd.f32 %v2124, %v2276
  %v2278 = vpop.f32.mrf.mxu0
  %v2279 = vadd.f32 %v2126, %v2278
  %v2280 = vpop.f32.mrf.mxu0
  %v2281 = vadd.f32 %v2128, %v2280
  %v2282 = vpop.f32.mrf.mxu0
  %v2283 = vadd.f32 %v2130, %v2282
  %2284 = vmatprep.mubr.bf16.mxu0 0
  %2285 = vmatmul.mubr.bf16.gmra.mxu0 %v1389
  %v2286 = vpop.f32.mrf.mxu0
  %v2287 = vadd.f32 %v2134, %v2286
  %v2288 = vpop.f32.mrf.mxu0
  %v2289 = vadd.f32 %v2136, %v2288
  %v2290 = vpop.f32.mrf.mxu0
  %v2291 = vadd.f32 %v2138, %v2290
  %v2292 = vpop.f32.mrf.mxu0
  %v2293 = vadd.f32 %v2140, %v2292
  %2294 = vmatprep.mubr.bf16.mxu0 0
  %2295 = vmatmul.mubr.bf16.gmra.mxu0 %v1392
  %v2296 = vpop.f32.mrf.mxu0
  %v2297 = vadd.f32 %v2144, %v2296
  %v2298 = vpop.f32.mrf.mxu0
  %v2299 = vadd.f32 %v2146, %v2298
  %v2300 = vpop.f32.mrf.mxu0
  %v2301 = vadd.f32 %v2148, %v2300
  %v2302 = vpop.f32.mrf.mxu0
  %v2303 = vadd.f32 %v2150, %v2302
  %2304 = vmatprep.mubr.bf16.mxu0 0
  %2305 = vmatmul.mubr.bf16.gmra.mxu0 %v1395
  %v2306 = vpop.f32.mrf.mxu0
  %v2307 = vadd.f32 %v2154, %v2306
  %v2308 = vpop.f32.mrf.mxu0
  %v2309 = vadd.f32 %v2156, %v2308
  %v2310 = vpop.f32.mrf.mxu0
  %v2311 = vadd.f32 %v2158, %v2310
  %v2312 = vpop.f32.mrf.mxu0
  %v2313 = vadd.f32 %v2160, %v2312
  %2314 = vdwg.mxu0
  %v2316 = vsel %vm235, %v667, 0
  %v2319 = vsel %vm235, %v669, 0
  %v2322 = vsel %vm235, %v671, 0
  %v2325 = vsel %vm235, %v673, 0
  %v2328 = vsel %vm235, %v675, 0
  %v2331 = vsel %vm235, %v677, 0
  %v2334 = vsel %vm235, %v680, 0
  %v2337 = vsel %vm235, %v682, 0
  %v2340 = vsel %vm235, %v684, 0
  %v2343 = vsel %vm235, %v686, 0
  %v2346 = vsel %vm235, %v688, 0
  %v2349 = vsel %vm235, %v690, 0
  %2351 = vmatprep.subr.bf16.mxu0 %v1188
  %2352 = vmatpush1.bf16.msra.mxu0 %v1187
  %2353 = vmatprep.subr.bf16.mxu0 %v1182
  %2354 = vmatpush1.bf16.msra.mxu0 %v1181
  %2355 = vmatprep.subr.bf16.mxu0 %v1176
  %2356 = vmatpush1.bf16.msra.mxu0 %v1175
  %2357 = vmatprep.subr.bf16.mxu0 %v1170
  %2358 = vmatpush1.bf16.msra.mxu0 %v1169
  %2359 = vmatprep.subr.bf16.mxu0 %v1164
  %2360 = vmatpush1.bf16.msra.mxu0 %v1163
  %2361 = vmatprep.subr.bf16.mxu0 %v1158
  %2362 = vmatpush1.bf16.msra.mxu0 %v1157
  %2363 = vmatprep.subr.bf16.mxu0 %v1152
  %2364 = vmatpush1.bf16.msra.mxu0 %v1151
  %2365 = vmatprep.subr.bf16.mxu0 %v1146
  %2366 = vmatpush1.bf16.msra.mxu0 %v1145
  %2367 = vmatprep.subr.bf16.mxu0 %v1236
  %2368 = vmatpush2.bf16.msra.mxu0 %v1235
  %2369 = vmatprep.subr.bf16.mxu0 %v1230
  %2370 = vmatpush2.bf16.msra.mxu0 %v1229
  %2371 = vmatprep.subr.bf16.mxu0 %v1224
  %2372 = vmatpush2.bf16.msra.mxu0 %v1223
  %2373 = vmatprep.subr.bf16.mxu0 %v1218
  %2374 = vmatpush2.bf16.msra.mxu0 %v1217
  %2375 = vmatprep.subr.bf16.mxu0 %v1212
  %2376 = vmatpush2.bf16.msra.mxu0 %v1211
  %2377 = vmatprep.subr.bf16.mxu0 %v1206
  %2378 = vmatpush2.bf16.msra.mxu0 %v1205
  %2379 = vmatprep.subr.bf16.mxu0 %v1200
  %2380 = vmatpush2.bf16.msra.mxu0 %v1199
  %2381 = vmatprep.subr.bf16.mxu0 %v1194
  %2382 = vmatpush2.bf16.msra.mxu0 %v1193
  %2383 = vmatprep.mubr.bf16.mxu0 %v666
  %2384 = vmatmul.mubr.bf16.gmra.mxu0 %v665
  %v2385 = vpop.f32.mrf.mxu0
  %v2386 = vadd.f32 %v1585, %v2385
  %v2387 = vpop.f32.mrf.mxu0
  %v2388 = vadd.f32 %v1587, %v2387
  %v2389 = vpop.f32.mrf.mxu0
  %v2390 = vadd.f32 %v1589, %v2389
  %v2391 = vpop.f32.mrf.mxu0
  %v2392 = vadd.f32 %v1591, %v2391
  %2393 = vmatprep.mubr.bf16.mxu0 %v668
  %2394 = vmatmul.mubr.bf16.gmra.mxu0 %v666
  %v2395 = vpop.f32.mrf.mxu0
  %v2396 = vadd.f32 %v1595, %v2395
  %v2397 = vpop.f32.mrf.mxu0
  %v2398 = vadd.f32 %v1597, %v2397
  %v2399 = vpop.f32.mrf.mxu0
  %v2400 = vadd.f32 %v1599, %v2399
  %v2401 = vpop.f32.mrf.mxu0
  %v2402 = vadd.f32 %v1601, %v2401
  %2403 = vmatprep.mubr.bf16.mxu0 %v670
  %2404 = vmatmul.mubr.bf16.gmra.mxu0 %v668
  %v2405 = vpop.f32.mrf.mxu0
  %v2406 = vadd.f32 %v1605, %v2405
  %v2407 = vpop.f32.mrf.mxu0
  %v2408 = vadd.f32 %v1607, %v2407
  %v2409 = vpop.f32.mrf.mxu0
  %v2410 = vadd.f32 %v1609, %v2409
  %v2411 = vpop.f32.mrf.mxu0
  %v2412 = vadd.f32 %v1611, %v2411
  %2413 = vmatprep.mubr.bf16.mxu0 %v672
  %2414 = vmatmul.mubr.bf16.gmra.mxu0 %v670
  %v2415 = vpop.f32.mrf.mxu0
  %v2416 = vadd.f32 %v1615, %v2415
  %v2417 = vpop.f32.mrf.mxu0
  %v2418 = vadd.f32 %v1617, %v2417
  %v2419 = vpop.f32.mrf.mxu0
  %v2420 = vadd.f32 %v1619, %v2419
  %v2421 = vpop.f32.mrf.mxu0
  %v2422 = vadd.f32 %v1621, %v2421
  %2423 = vmatprep.mubr.bf16.mxu0 %v674
  %2424 = vmatmul.mubr.bf16.gmra.mxu0 %v672
  %v2425 = vpop.f32.mrf.mxu0
  %v2426 = vadd.f32 %v1625, %v2425
  %v2427 = vpop.f32.mrf.mxu0
  %v2428 = vadd.f32 %v1627, %v2427
  %v2429 = vpop.f32.mrf.mxu0
  %v2430 = vadd.f32 %v1629, %v2429
  %v2431 = vpop.f32.mrf.mxu0
  %v2432 = vadd.f32 %v1631, %v2431
  %2433 = vmatprep.mubr.bf16.mxu0 %v676
  %2434 = vmatmul.mubr.bf16.gmra.mxu0 %v674
  %v2435 = vpop.f32.mrf.mxu0
  %v2436 = vadd.f32 %v1635, %v2435
  %v2437 = vpop.f32.mrf.mxu0
  %v2438 = vadd.f32 %v1637, %v2437
  %v2439 = vpop.f32.mrf.mxu0
  %v2440 = vadd.f32 %v1639, %v2439
  %v2441 = vpop.f32.mrf.mxu0
  %v2442 = vadd.f32 %v1641, %v2441
  %2443 = vmatprep.mubr.bf16.mxu0 %v679
  %2444 = vmatmul.mubr.bf16.gmra.mxu0 %v678
  %v2445 = vpop.f32.mrf.mxu0
  %v2446 = vadd.f32 %v1645, %v2445
  %v2447 = vpop.f32.mrf.mxu0
  %v2448 = vadd.f32 %v1647, %v2447
  %v2449 = vpop.f32.mrf.mxu0
  %v2450 = vadd.f32 %v1649, %v2449
  %v2451 = vpop.f32.mrf.mxu0
  %v2452 = vadd.f32 %v1651, %v2451
  %2453 = vmatprep.mubr.bf16.mxu0 %v681
  %2454 = vmatmul.mubr.bf16.gmra.mxu0 %v679
  %v2455 = vpop.f32.mrf.mxu0
  %v2456 = vadd.f32 %v1655, %v2455
  %v2457 = vpop.f32.mrf.mxu0
  %v2458 = vadd.f32 %v1657, %v2457
  %v2459 = vpop.f32.mrf.mxu0
  %v2460 = vadd.f32 %v1659, %v2459
  %v2461 = vpop.f32.mrf.mxu0
  %v2462 = vadd.f32 %v1661, %v2461
  %2463 = vmatprep.mubr.bf16.mxu0 %v683
  %2464 = vmatmul.mubr.bf16.gmra.mxu0 %v681
  %v2465 = vpop.f32.mrf.mxu0
  %v2466 = vadd.f32 %v1665, %v2465
  %v2467 = vpop.f32.mrf.mxu0
  %v2468 = vadd.f32 %v1667, %v2467
  %v2469 = vpop.f32.mrf.mxu0
  %v2470 = vadd.f32 %v1669, %v2469
  %v2471 = vpop.f32.mrf.mxu0
  %v2472 = vadd.f32 %v1671, %v2471
  %2473 = vmatprep.mubr.bf16.mxu0 %v685
  %2474 = vmatmul.mubr.bf16.gmra.mxu0 %v683
  %v2475 = vpop.f32.mrf.mxu0
  %v2476 = vadd.f32 %v1675, %v2475
  %v2477 = vpop.f32.mrf.mxu0
  %v2478 = vadd.f32 %v1677, %v2477
  %v2479 = vpop.f32.mrf.mxu0
  %v2480 = vadd.f32 %v1679, %v2479
  %v2481 = vpop.f32.mrf.mxu0
  %v2482 = vadd.f32 %v1681, %v2481
  %2483 = vmatprep.mubr.bf16.mxu0 %v687
  %2484 = vmatmul.mubr.bf16.gmra.mxu0 %v685
  %v2485 = vpop.f32.mrf.mxu0
  %v2486 = vadd.f32 %v1685, %v2485
  %v2487 = vpop.f32.mrf.mxu0
  %v2488 = vadd.f32 %v1687, %v2487
  %v2489 = vpop.f32.mrf.mxu0
  %v2490 = vadd.f32 %v1689, %v2489
  %v2491 = vpop.f32.mrf.mxu0
  %v2492 = vadd.f32 %v1691, %v2491
  %2493 = vmatprep.mubr.bf16.mxu0 %v689
  %2494 = vmatmul.mubr.bf16.gmra.mxu0 %v687
  %v2495 = vpop.f32.mrf.mxu0
  %v2496 = vadd.f32 %v1695, %v2495
  %v2497 = vpop.f32.mrf.mxu0
  %v2498 = vadd.f32 %v1697, %v2497
  %v2499 = vpop.f32.mrf.mxu0
  %v2500 = vadd.f32 %v1699, %v2499
  %v2501 = vpop.f32.mrf.mxu0
  %v2502 = vadd.f32 %v1701, %v2501
  %2503 = vdwg.mxu0
  %2504 = vmatprep.subr.bf16.mxu0 0
  %2505 = vmatpush1.bf16.msra.mxu0 0
  %2506 = vmatprep.subr.bf16.mxu0 0
  %2507 = vmatpush1.bf16.msra.mxu0 0
  %2508 = vmatprep.subr.bf16.mxu0 0
  %2509 = vmatpush1.bf16.msra.mxu0 0
  %2510 = vmatprep.subr.bf16.mxu0 0
  %2511 = vmatpush1.bf16.msra.mxu0 0
  %2512 = vmatprep.subr.bf16.mxu0 0
  %2513 = vmatpush1.bf16.msra.mxu0 0
  %2514 = vmatprep.subr.bf16.mxu0 0
  %2515 = vmatpush1.bf16.msra.mxu0 0
  %2516 = vmatprep.subr.bf16.mxu0 %v1248
  %2517 = vmatpush1.bf16.msra.mxu0 %v1247
  %2518 = vmatprep.subr.bf16.mxu0 %v1242
  %2519 = vmatpush1.bf16.msra.mxu0 %v1241
  %2520 = vmatprep.subr.bf16.mxu0 0
  %2521 = vmatpush2.bf16.msra.mxu0 0
  %2522 = vmatprep.subr.bf16.mxu0 0
  %2523 = vmatpush2.bf16.msra.mxu0 0
  %2524 = vmatprep.subr.bf16.mxu0 0
  %2525 = vmatpush2.bf16.msra.mxu0 0
  %2526 = vmatprep.subr.bf16.mxu0 0
  %2527 = vmatpush2.bf16.msra.mxu0 0
  %2528 = vmatprep.subr.bf16.mxu0 0
  %2529 = vmatpush2.bf16.msra.mxu0 0
  %2530 = vmatprep.subr.bf16.mxu0 0
  %2531 = vmatpush2.bf16.msra.mxu0 0
  %2532 = vmatprep.subr.bf16.mxu0 0
  %2533 = vmatpush2.bf16.msra.mxu0 0
  %2534 = vmatprep.subr.bf16.mxu0 0
  %2535 = vmatpush2.bf16.msra.mxu0 0
  %2536 = vmatprep.mubr.bf16.mxu0 0
  %2537 = vmatmul.mubr.bf16.gmra.mxu0 %v2316
  %v2538 = vpop.f32.mrf.mxu0
  %v2539 = vadd.f32 %v2386, %v2538
  %v2540 = vpop.f32.mrf.mxu0
  %v2541 = vadd.f32 %v2388, %v2540
  %v2542 = vpop.f32.mrf.mxu0
  %v2543 = vadd.f32 %v2390, %v2542
  %v2544 = vpop.f32.mrf.mxu0
  %v2545 = vadd.f32 %v2392, %v2544
  %2546 = vmatprep.mubr.bf16.mxu0 0
  %2547 = vmatmul.mubr.bf16.gmra.mxu0 %v2319
  %v2548 = vpop.f32.mrf.mxu0
  %v2549 = vadd.f32 %v2396, %v2548
  %v2550 = vpop.f32.mrf.mxu0
  %v2551 = vadd.f32 %v2398, %v2550
  %v2552 = vpop.f32.mrf.mxu0
  %v2553 = vadd.f32 %v2400, %v2552
  %v2554 = vpop.f32.mrf.mxu0
  %v2555 = vadd.f32 %v2402, %v2554
  %2556 = vmatprep.mubr.bf16.mxu0 0
  %2557 = vmatmul.mubr.bf16.gmra.mxu0 %v2322
  %v2558 = vpop.f32.mrf.mxu0
  %v2559 = vadd.f32 %v2406, %v2558
  %v2560 = vpop.f32.mrf.mxu0
  %v2561 = vadd.f32 %v2408, %v2560
  %v2562 = vpop.f32.mrf.mxu0
  %v2563 = vadd.f32 %v2410, %v2562
  %v2564 = vpop.f32.mrf.mxu0
  %v2565 = vadd.f32 %v2412, %v2564
  %2566 = vmatprep.mubr.bf16.mxu0 0
  %2567 = vmatmul.mubr.bf16.gmra.mxu0 %v2325
  %v2568 = vpop.f32.mrf.mxu0
  %v2569 = vadd.f32 %v2416, %v2568
  %v2570 = vpop.f32.mrf.mxu0
  %v2571 = vadd.f32 %v2418, %v2570
  %v2572 = vpop.f32.mrf.mxu0
  %v2573 = vadd.f32 %v2420, %v2572
  %v2574 = vpop.f32.mrf.mxu0
  %v2575 = vadd.f32 %v2422, %v2574
  %2576 = vmatprep.mubr.bf16.mxu0 0
  %2577 = vmatmul.mubr.bf16.gmra.mxu0 %v2328
  %v2578 = vpop.f32.mrf.mxu0
  %v2579 = vadd.f32 %v2426, %v2578
  %v2580 = vpop.f32.mrf.mxu0
  %v2581 = vadd.f32 %v2428, %v2580
  %v2582 = vpop.f32.mrf.mxu0
  %v2583 = vadd.f32 %v2430, %v2582
  %v2584 = vpop.f32.mrf.mxu0
  %v2585 = vadd.f32 %v2432, %v2584
  %2586 = vmatprep.mubr.bf16.mxu0 0
  %2587 = vmatmul.mubr.bf16.gmra.mxu0 %v2331
  %v2588 = vpop.f32.mrf.mxu0
  %v2589 = vadd.f32 %v2436, %v2588
  %v2590 = vpop.f32.mrf.mxu0
  %v2591 = vadd.f32 %v2438, %v2590
  %v2592 = vpop.f32.mrf.mxu0
  %v2593 = vadd.f32 %v2440, %v2592
  %v2594 = vpop.f32.mrf.mxu0
  %v2595 = vadd.f32 %v2442, %v2594
  %2596 = vmatprep.mubr.bf16.mxu0 0
  %2597 = vmatmul.mubr.bf16.gmra.mxu0 %v2334
  %v2598 = vpop.f32.mrf.mxu0
  %v2599 = vadd.f32 %v2446, %v2598
  %v2600 = vpop.f32.mrf.mxu0
  %v2601 = vadd.f32 %v2448, %v2600
  %v2602 = vpop.f32.mrf.mxu0
  %v2603 = vadd.f32 %v2450, %v2602
  %v2604 = vpop.f32.mrf.mxu0
  %v2605 = vadd.f32 %v2452, %v2604
  %2606 = vmatprep.mubr.bf16.mxu0 0
  %2607 = vmatmul.mubr.bf16.gmra.mxu0 %v2337
  %v2608 = vpop.f32.mrf.mxu0
  %v2609 = vadd.f32 %v2456, %v2608
  %v2610 = vpop.f32.mrf.mxu0
  %v2611 = vadd.f32 %v2458, %v2610
  %v2612 = vpop.f32.mrf.mxu0
  %v2613 = vadd.f32 %v2460, %v2612
  %v2614 = vpop.f32.mrf.mxu0
  %v2615 = vadd.f32 %v2462, %v2614
  %2616 = vmatprep.mubr.bf16.mxu0 0
  %2617 = vmatmul.mubr.bf16.gmra.mxu0 %v2340
  %v2618 = vpop.f32.mrf.mxu0
  %v2619 = vadd.f32 %v2466, %v2618
  %v2620 = vpop.f32.mrf.mxu0
  %v2621 = vadd.f32 %v2468, %v2620
  %v2622 = vpop.f32.mrf.mxu0
  %v2623 = vadd.f32 %v2470, %v2622
  %v2624 = vpop.f32.mrf.mxu0
  %v2625 = vadd.f32 %v2472, %v2624
  %2626 = vmatprep.mubr.bf16.mxu0 0
  %2627 = vmatmul.mubr.bf16.gmra.mxu0 %v2343
  %v2628 = vpop.f32.mrf.mxu0
  %v2629 = vadd.f32 %v2476, %v2628
  %v2630 = vpop.f32.mrf.mxu0
  %v2631 = vadd.f32 %v2478, %v2630
  %v2632 = vpop.f32.mrf.mxu0
  %v2633 = vadd.f32 %v2480, %v2632
  %v2634 = vpop.f32.mrf.mxu0
  %v2635 = vadd.f32 %v2482, %v2634
  %2636 = vmatprep.mubr.bf16.mxu0 0
  %2637 = vmatmul.mubr.bf16.gmra.mxu0 %v2346
  %v2638 = vpop.f32.mrf.mxu0
  %v2639 = vadd.f32 %v2486, %v2638
  %v2640 = vpop.f32.mrf.mxu0
  %v2641 = vadd.f32 %v2488, %v2640
  %v2642 = vpop.f32.mrf.mxu0
  %v2643 = vadd.f32 %v2490, %v2642
  %v2644 = vpop.f32.mrf.mxu0
  %v2645 = vadd.f32 %v2492, %v2644
  %2646 = vmatprep.mubr.bf16.mxu0 0
  %2647 = vmatmul.mubr.bf16.gmra.mxu0 %v2349
  %v2648 = vpop.f32.mrf.mxu0
  %v2649 = vadd.f32 %v2496, %v2648
  %v2650 = vpop.f32.mrf.mxu0
  %v2651 = vadd.f32 %v2498, %v2650
  %v2652 = vpop.f32.mrf.mxu0
  %v2653 = vadd.f32 %v2500, %v2652
  %v2654 = vpop.f32.mrf.mxu0
  %v2655 = vadd.f32 %v2502, %v2654
  %2656 = vdwg.mxu0
  %2657 = vmatprep.subr.bf16.mxu0 %v1190
  %2658 = vmatpush1.bf16.msra.mxu0 %v1189
  %2659 = vmatprep.subr.bf16.mxu0 %v1184
  %2660 = vmatpush1.bf16.msra.mxu0 %v1183
  %2661 = vmatprep.subr.bf16.mxu0 %v1178
  %2662 = vmatpush1.bf16.msra.mxu0 %v1177
  %2663 = vmatprep.subr.bf16.mxu0 %v1172
  %2664 = vmatpush1.bf16.msra.mxu0 %v1171
  %2665 = vmatprep.subr.bf16.mxu0 %v1166
  %2666 = vmatpush1.bf16.msra.mxu0 %v1165
  %2667 = vmatprep.subr.bf16.mxu0 %v1160
  %2668 = vmatpush1.bf16.msra.mxu0 %v1159
  %2669 = vmatprep.subr.bf16.mxu0 %v1154
  %2670 = vmatpush1.bf16.msra.mxu0 %v1153
  %2671 = vmatprep.subr.bf16.mxu0 %v1148
  %2672 = vmatpush1.bf16.msra.mxu0 %v1147
  %2673 = vmatprep.subr.bf16.mxu0 %v1238
  %2674 = vmatpush2.bf16.msra.mxu0 %v1237
  %2675 = vmatprep.subr.bf16.mxu0 %v1232
  %2676 = vmatpush2.bf16.msra.mxu0 %v1231
  %2677 = vmatprep.subr.bf16.mxu0 %v1226
  %2678 = vmatpush2.bf16.msra.mxu0 %v1225
  %2679 = vmatprep.subr.bf16.mxu0 %v1220
  %2680 = vmatpush2.bf16.msra.mxu0 %v1219
  %2681 = vmatprep.subr.bf16.mxu0 %v1214
  %2682 = vmatpush2.bf16.msra.mxu0 %v1213
  %2683 = vmatprep.subr.bf16.mxu0 %v1208
  %2684 = vmatpush2.bf16.msra.mxu0 %v1207
  %2685 = vmatprep.subr.bf16.mxu0 %v1202
  %2686 = vmatpush2.bf16.msra.mxu0 %v1201
  %2687 = vmatprep.subr.bf16.mxu0 %v1196
  %2688 = vmatpush2.bf16.msra.mxu0 %v1195
  %2689 = vmatprep.mubr.bf16.mxu0 %v666
  %2690 = vmatmul.mubr.bf16.gmra.mxu0 %v665
  %v2691 = vpop.f32.mrf.mxu0
  %v2692 = vadd.f32 %v1891, %v2691
  %v2693 = vpop.f32.mrf.mxu0
  %v2694 = vadd.f32 %v1893, %v2693
  %v2695 = vpop.f32.mrf.mxu0
  %v2696 = vadd.f32 %v1895, %v2695
  %v2697 = vpop.f32.mrf.mxu0
  %v2698 = vadd.f32 %v1897, %v2697
  %2699 = vmatprep.mubr.bf16.mxu0 %v668
  %2700 = vmatmul.mubr.bf16.gmra.mxu0 %v666
  %v2701 = vpop.f32.mrf.mxu0
  %v2702 = vadd.f32 %v1901, %v2701
  %v2703 = vpop.f32.mrf.mxu0
  %v2704 = vadd.f32 %v1903, %v2703
  %v2705 = vpop.f32.mrf.mxu0
  %v2706 = vadd.f32 %v1905, %v2705
  %v2707 = vpop.f32.mrf.mxu0
  %v2708 = vadd.f32 %v1907, %v2707
  %2709 = vmatprep.mubr.bf16.mxu0 %v670
  %2710 = vmatmul.mubr.bf16.gmra.mxu0 %v668
  %v2711 = vpop.f32.mrf.mxu0
  %v2712 = vadd.f32 %v1911, %v2711
  %v2713 = vpop.f32.mrf.mxu0
  %v2714 = vadd.f32 %v1913, %v2713
  %v2715 = vpop.f32.mrf.mxu0
  %v2716 = vadd.f32 %v1915, %v2715
  %v2717 = vpop.f32.mrf.mxu0
  %v2718 = vadd.f32 %v1917, %v2717
  %2719 = vmatprep.mubr.bf16.mxu0 %v672
  %2720 = vmatmul.mubr.bf16.gmra.mxu0 %v670
  %v2721 = vpop.f32.mrf.mxu0
  %v2722 = vadd.f32 %v1921, %v2721
  %v2723 = vpop.f32.mrf.mxu0
  %v2724 = vadd.f32 %v1923, %v2723
  %v2725 = vpop.f32.mrf.mxu0
  %v2726 = vadd.f32 %v1925, %v2725
  %v2727 = vpop.f32.mrf.mxu0
  %v2728 = vadd.f32 %v1927, %v2727
  %2729 = vmatprep.mubr.bf16.mxu0 %v674
  %2730 = vmatmul.mubr.bf16.gmra.mxu0 %v672
  %v2731 = vpop.f32.mrf.mxu0
  %v2732 = vadd.f32 %v1931, %v2731
  %v2733 = vpop.f32.mrf.mxu0
  %v2734 = vadd.f32 %v1933, %v2733
  %v2735 = vpop.f32.mrf.mxu0
  %v2736 = vadd.f32 %v1935, %v2735
  %v2737 = vpop.f32.mrf.mxu0
  %v2738 = vadd.f32 %v1937, %v2737
  %2739 = vmatprep.mubr.bf16.mxu0 %v676
  %2740 = vmatmul.mubr.bf16.gmra.mxu0 %v674
  %v2741 = vpop.f32.mrf.mxu0
  %v2742 = vadd.f32 %v1941, %v2741
  %v2743 = vpop.f32.mrf.mxu0
  %v2744 = vadd.f32 %v1943, %v2743
  %v2745 = vpop.f32.mrf.mxu0
  %v2746 = vadd.f32 %v1945, %v2745
  %v2747 = vpop.f32.mrf.mxu0
  %v2748 = vadd.f32 %v1947, %v2747
  %2749 = vmatprep.mubr.bf16.mxu0 %v679
  %2750 = vmatmul.mubr.bf16.gmra.mxu0 %v678
  %v2751 = vpop.f32.mrf.mxu0
  %v2752 = vadd.f32 %v1951, %v2751
  %v2753 = vpop.f32.mrf.mxu0
  %v2754 = vadd.f32 %v1953, %v2753
  %v2755 = vpop.f32.mrf.mxu0
  %v2756 = vadd.f32 %v1955, %v2755
  %v2757 = vpop.f32.mrf.mxu0
  %v2758 = vadd.f32 %v1957, %v2757
  %2759 = vmatprep.mubr.bf16.mxu0 %v681
  %2760 = vmatmul.mubr.bf16.gmra.mxu0 %v679
  %v2761 = vpop.f32.mrf.mxu0
  %v2762 = vadd.f32 %v1961, %v2761
  %v2763 = vpop.f32.mrf.mxu0
  %v2764 = vadd.f32 %v1963, %v2763
  %v2765 = vpop.f32.mrf.mxu0
  %v2766 = vadd.f32 %v1965, %v2765
  %v2767 = vpop.f32.mrf.mxu0
  %v2768 = vadd.f32 %v1967, %v2767
  %2769 = vmatprep.mubr.bf16.mxu0 %v683
  %2770 = vmatmul.mubr.bf16.gmra.mxu0 %v681
  %v2771 = vpop.f32.mrf.mxu0
  %v2772 = vadd.f32 %v1971, %v2771
  %v2773 = vpop.f32.mrf.mxu0
  %v2774 = vadd.f32 %v1973, %v2773
  %v2775 = vpop.f32.mrf.mxu0
  %v2776 = vadd.f32 %v1975, %v2775
  %v2777 = vpop.f32.mrf.mxu0
  %v2778 = vadd.f32 %v1977, %v2777
  %2779 = vmatprep.mubr.bf16.mxu0 %v685
  %2780 = vmatmul.mubr.bf16.gmra.mxu0 %v683
  %v2781 = vpop.f32.mrf.mxu0
  %v2782 = vadd.f32 %v1981, %v2781
  %v2783 = vpop.f32.mrf.mxu0
  %v2784 = vadd.f32 %v1983, %v2783
  %v2785 = vpop.f32.mrf.mxu0
  %v2786 = vadd.f32 %v1985, %v2785
  %v2787 = vpop.f32.mrf.mxu0
  %v2788 = vadd.f32 %v1987, %v2787
  %2789 = vmatprep.mubr.bf16.mxu0 %v687
  %2790 = vmatmul.mubr.bf16.gmra.mxu0 %v685
  %v2791 = vpop.f32.mrf.mxu0
  %v2792 = vadd.f32 %v1991, %v2791
  %v2793 = vpop.f32.mrf.mxu0
  %v2794 = vadd.f32 %v1993, %v2793
  %v2795 = vpop.f32.mrf.mxu0
  %v2796 = vadd.f32 %v1995, %v2795
  %v2797 = vpop.f32.mrf.mxu0
  %v2798 = vadd.f32 %v1997, %v2797
  %2799 = vmatprep.mubr.bf16.mxu0 %v689
  %2800 = vmatmul.mubr.bf16.gmra.mxu0 %v687
  %v2801 = vpop.f32.mrf.mxu0
  %v2802 = vadd.f32 %v2001, %v2801
  %v2803 = vpop.f32.mrf.mxu0
  %v2804 = vadd.f32 %v2003, %v2803
  %v2805 = vpop.f32.mrf.mxu0
  %v2806 = vadd.f32 %v2005, %v2805
  %v2807 = vpop.f32.mrf.mxu0
  %v2808 = vadd.f32 %v2007, %v2807
  %2809 = vdwg.mxu0
  %2810 = vmatprep.subr.bf16.mxu0 0
  %2811 = vmatpush1.bf16.msra.mxu0 0
  %2812 = vmatprep.subr.bf16.mxu0 0
  %2813 = vmatpush1.bf16.msra.mxu0 0
  %2814 = vmatprep.subr.bf16.mxu0 0
  %2815 = vmatpush1.bf16.msra.mxu0 0
  %2816 = vmatprep.subr.bf16.mxu0 0
  %2817 = vmatpush1.bf16.msra.mxu0 0
  %2818 = vmatprep.subr.bf16.mxu0 0
  %2819 = vmatpush1.bf16.msra.mxu0 0
  %2820 = vmatprep.subr.bf16.mxu0 0
  %2821 = vmatpush1.bf16.msra.mxu0 0
  %2822 = vmatprep.subr.bf16.mxu0 %v1250
  %2823 = vmatpush1.bf16.msra.mxu0 %v1249
  %2824 = vmatprep.subr.bf16.mxu0 %v1244
  %2825 = vmatpush1.bf16.msra.mxu0 %v1243
  %2826 = vmatprep.subr.bf16.mxu0 0
  %2827 = vmatpush2.bf16.msra.mxu0 0
  %2828 = vmatprep.subr.bf16.mxu0 0
  %2829 = vmatpush2.bf16.msra.mxu0 0
  %2830 = vmatprep.subr.bf16.mxu0 0
  %2831 = vmatpush2.bf16.msra.mxu0 0
  %2832 = vmatprep.subr.bf16.mxu0 0
  %2833 = vmatpush2.bf16.msra.mxu0 0
  %2834 = vmatprep.subr.bf16.mxu0 0
  %2835 = vmatpush2.bf16.msra.mxu0 0
  %2836 = vmatprep.subr.bf16.mxu0 0
  %2837 = vmatpush2.bf16.msra.mxu0 0
  %2838 = vmatprep.subr.bf16.mxu0 0
  %2839 = vmatpush2.bf16.msra.mxu0 0
  %2840 = vmatprep.subr.bf16.mxu0 0
  %2841 = vmatpush2.bf16.msra.mxu0 0
  %2842 = vmatprep.mubr.bf16.mxu0 0
  %2843 = vmatmul.mubr.bf16.gmra.mxu0 %v2316
  %v2844 = vpop.f32.mrf.mxu0
  %v2845 = vadd.f32 %v2692, %v2844
  %v2846 = vpop.f32.mrf.mxu0
  %v2847 = vadd.f32 %v2694, %v2846
  %v2848 = vpop.f32.mrf.mxu0
  %v2849 = vadd.f32 %v2696, %v2848
  %v2850 = vpop.f32.mrf.mxu0
  %v2851 = vadd.f32 %v2698, %v2850
  %2852 = vmatprep.mubr.bf16.mxu0 0
  %2853 = vmatmul.mubr.bf16.gmra.mxu0 %v2319
  %v2854 = vpop.f32.mrf.mxu0
  %v2855 = vadd.f32 %v2702, %v2854
  %v2856 = vpop.f32.mrf.mxu0
  %v2857 = vadd.f32 %v2704, %v2856
  %v2858 = vpop.f32.mrf.mxu0
  %v2859 = vadd.f32 %v2706, %v2858
  %v2860 = vpop.f32.mrf.mxu0
  %v2861 = vadd.f32 %v2708, %v2860
  %2862 = vmatprep.mubr.bf16.mxu0 0
  %2863 = vmatmul.mubr.bf16.gmra.mxu0 %v2322
  %v2864 = vpop.f32.mrf.mxu0
  %v2865 = vadd.f32 %v2712, %v2864
  %v2866 = vpop.f32.mrf.mxu0
  %v2867 = vadd.f32 %v2714, %v2866
  %v2868 = vpop.f32.mrf.mxu0
  %v2869 = vadd.f32 %v2716, %v2868
  %v2870 = vpop.f32.mrf.mxu0
  %v2871 = vadd.f32 %v2718, %v2870
  %2872 = vmatprep.mubr.bf16.mxu0 0
  %2873 = vmatmul.mubr.bf16.gmra.mxu0 %v2325
  %v2874 = vpop.f32.mrf.mxu0
  %v2875 = vadd.f32 %v2722, %v2874
  %v2876 = vpop.f32.mrf.mxu0
  %v2877 = vadd.f32 %v2724, %v2876
  %v2878 = vpop.f32.mrf.mxu0
  %v2879 = vadd.f32 %v2726, %v2878
  %v2880 = vpop.f32.mrf.mxu0
  %v2881 = vadd.f32 %v2728, %v2880
  %2882 = vmatprep.mubr.bf16.mxu0 0
  %2883 = vmatmul.mubr.bf16.gmra.mxu0 %v2328
  %v2884 = vpop.f32.mrf.mxu0
  %v2885 = vadd.f32 %v2732, %v2884
  %v2886 = vpop.f32.mrf.mxu0
  %v2887 = vadd.f32 %v2734, %v2886
  %v2888 = vpop.f32.mrf.mxu0
  %v2889 = vadd.f32 %v2736, %v2888
  %v2890 = vpop.f32.mrf.mxu0
  %v2891 = vadd.f32 %v2738, %v2890
  %2892 = vmatprep.mubr.bf16.mxu0 0
  %2893 = vmatmul.mubr.bf16.gmra.mxu0 %v2331
  %v2894 = vpop.f32.mrf.mxu0
  %v2895 = vadd.f32 %v2742, %v2894
  %v2896 = vpop.f32.mrf.mxu0
  %v2897 = vadd.f32 %v2744, %v2896
  %v2898 = vpop.f32.mrf.mxu0
  %v2899 = vadd.f32 %v2746, %v2898
  %v2900 = vpop.f32.mrf.mxu0
  %v2901 = vadd.f32 %v2748, %v2900
  %2902 = vmatprep.mubr.bf16.mxu0 0
  %2903 = vmatmul.mubr.bf16.gmra.mxu0 %v2334
  %v2904 = vpop.f32.mrf.mxu0
  %v2905 = vadd.f32 %v2752, %v2904
  %v2906 = vpop.f32.mrf.mxu0
  %v2907 = vadd.f32 %v2754, %v2906
  %v2908 = vpop.f32.mrf.mxu0
  %v2909 = vadd.f32 %v2756, %v2908
  %v2910 = vpop.f32.mrf.mxu0
  %v2911 = vadd.f32 %v2758, %v2910
  %2912 = vmatprep.mubr.bf16.mxu0 0
  %2913 = vmatmul.mubr.bf16.gmra.mxu0 %v2337
  %v2914 = vpop.f32.mrf.mxu0
  %v2915 = vadd.f32 %v2762, %v2914
  %v2916 = vpop.f32.mrf.mxu0
  %v2917 = vadd.f32 %v2764, %v2916
  %v2918 = vpop.f32.mrf.mxu0
  %v2919 = vadd.f32 %v2766, %v2918
  %v2920 = vpop.f32.mrf.mxu0
  %v2921 = vadd.f32 %v2768, %v2920
  %2922 = vmatprep.mubr.bf16.mxu0 0
  %2923 = vmatmul.mubr.bf16.gmra.mxu0 %v2340
  %v2924 = vpop.f32.mrf.mxu0
  %v2925 = vadd.f32 %v2772, %v2924
  %v2926 = vpop.f32.mrf.mxu0
  %v2927 = vadd.f32 %v2774, %v2926
  %v2928 = vpop.f32.mrf.mxu0
  %v2929 = vadd.f32 %v2776, %v2928
  %v2930 = vpop.f32.mrf.mxu0
  %v2931 = vadd.f32 %v2778, %v2930
  %2932 = vmatprep.mubr.bf16.mxu0 0
  %2933 = vmatmul.mubr.bf16.gmra.mxu0 %v2343
  %v2934 = vpop.f32.mrf.mxu0
  %v2935 = vadd.f32 %v2782, %v2934
  %v2936 = vpop.f32.mrf.mxu0
  %v2937 = vadd.f32 %v2784, %v2936
  %v2938 = vpop.f32.mrf.mxu0
  %v2939 = vadd.f32 %v2786, %v2938
  %v2940 = vpop.f32.mrf.mxu0
  %v2941 = vadd.f32 %v2788, %v2940
  %2942 = vmatprep.mubr.bf16.mxu0 0
  %2943 = vmatmul.mubr.bf16.gmra.mxu0 %v2346
  %v2944 = vpop.f32.mrf.mxu0
  %v2945 = vadd.f32 %v2792, %v2944
  %v2946 = vpop.f32.mrf.mxu0
  %v2947 = vadd.f32 %v2794, %v2946
  %v2948 = vpop.f32.mrf.mxu0
  %v2949 = vadd.f32 %v2796, %v2948
  %v2950 = vpop.f32.mrf.mxu0
  %v2951 = vadd.f32 %v2798, %v2950
  %2952 = vmatprep.mubr.bf16.mxu0 0
  %2953 = vmatmul.mubr.bf16.gmra.mxu0 %v2349
  %v2954 = vpop.f32.mrf.mxu0
  %v2955 = vadd.f32 %v2802, %v2954
  %v2956 = vpop.f32.mrf.mxu0
  %v2957 = vadd.f32 %v2804, %v2956
  %v2958 = vpop.f32.mrf.mxu0
  %v2959 = vadd.f32 %v2806, %v2958
  %v2960 = vpop.f32.mrf.mxu0
  %v2961 = vadd.f32 %v2808, %v2960
  %2962 = vdwg.mxu0
  %2963 = vmatprep.subr.bf16.mxu0 %v1192
  %2964 = vmatpush1.bf16.msra.mxu0 %v1191
  %2965 = vmatprep.subr.bf16.mxu0 %v1186
  %2966 = vmatpush1.bf16.msra.mxu0 %v1185
  %2967 = vmatprep.subr.bf16.mxu0 %v1180
  %2968 = vmatpush1.bf16.msra.mxu0 %v1179
  %2969 = vmatprep.subr.bf16.mxu0 %v1174
  %2970 = vmatpush1.bf16.msra.mxu0 %v1173
  %2971 = vmatprep.subr.bf16.mxu0 %v1168
  %2972 = vmatpush1.bf16.msra.mxu0 %v1167
  %2973 = vmatprep.subr.bf16.mxu0 %v1162
  %2974 = vmatpush1.bf16.msra.mxu0 %v1161
  %2975 = vmatprep.subr.bf16.mxu0 %v1156
  %2976 = vmatpush1.bf16.msra.mxu0 %v1155
  %2977 = vmatprep.subr.bf16.mxu0 %v1150
  %2978 = vmatpush1.bf16.msra.mxu0 %v1149
  %2979 = vmatprep.subr.bf16.mxu0 %v1240
  %2980 = vmatpush2.bf16.msra.mxu0 %v1239
  %2981 = vmatprep.subr.bf16.mxu0 %v1234
  %2982 = vmatpush2.bf16.msra.mxu0 %v1233
  %2983 = vmatprep.subr.bf16.mxu0 %v1228
  %2984 = vmatpush2.bf16.msra.mxu0 %v1227
  %2985 = vmatprep.subr.bf16.mxu0 %v1222
  %2986 = vmatpush2.bf16.msra.mxu0 %v1221
  %2987 = vmatprep.subr.bf16.mxu0 %v1216
  %2988 = vmatpush2.bf16.msra.mxu0 %v1215
  %2989 = vmatprep.subr.bf16.mxu0 %v1210
  %2990 = vmatpush2.bf16.msra.mxu0 %v1209
  %2991 = vmatprep.subr.bf16.mxu0 %v1204
  %2992 = vmatpush2.bf16.msra.mxu0 %v1203
  %2993 = vmatprep.subr.bf16.mxu0 %v1198
  %2994 = vmatpush2.bf16.msra.mxu0 %v1197
  %2995 = vmatprep.mubr.bf16.mxu0 %v666
  %2996 = vmatmul.mubr.bf16.gmra.mxu0 %v665
  %v2997 = vpop.f32.mrf.mxu0
  %v2998 = vadd.f32 %v2197, %v2997
  %v2999 = vpop.f32.mrf.mxu0
  %v3000 = vadd.f32 %v2199, %v2999
  %v3001 = vpop.f32.mrf.mxu0
  %v3002 = vadd.f32 %v2201, %v3001
  %v3003 = vpop.f32.mrf.mxu0
  %v3004 = vadd.f32 %v2203, %v3003
  %3005 = vmatprep.mubr.bf16.mxu0 %v668
  %3006 = vmatmul.mubr.bf16.gmra.mxu0 %v666
  %v3007 = vpop.f32.mrf.mxu0
  %v3008 = vadd.f32 %v2207, %v3007
  %v3009 = vpop.f32.mrf.mxu0
  %v3010 = vadd.f32 %v2209, %v3009
  %v3011 = vpop.f32.mrf.mxu0
  %v3012 = vadd.f32 %v2211, %v3011
  %v3013 = vpop.f32.mrf.mxu0
  %v3014 = vadd.f32 %v2213, %v3013
  %3015 = vmatprep.mubr.bf16.mxu0 %v670
  %3016 = vmatmul.mubr.bf16.gmra.mxu0 %v668
  %v3017 = vpop.f32.mrf.mxu0
  %v3018 = vadd.f32 %v2217, %v3017
  %v3019 = vpop.f32.mrf.mxu0
  %v3020 = vadd.f32 %v2219, %v3019
  %v3021 = vpop.f32.mrf.mxu0
  %v3022 = vadd.f32 %v2221, %v3021
  %v3023 = vpop.f32.mrf.mxu0
  %v3024 = vadd.f32 %v2223, %v3023
  %3025 = vmatprep.mubr.bf16.mxu0 %v672
  %3026 = vmatmul.mubr.bf16.gmra.mxu0 %v670
  %v3027 = vpop.f32.mrf.mxu0
  %v3028 = vadd.f32 %v2227, %v3027
  %v3029 = vpop.f32.mrf.mxu0
  %v3030 = vadd.f32 %v2229, %v3029
  %v3031 = vpop.f32.mrf.mxu0
  %v3032 = vadd.f32 %v2231, %v3031
  %v3033 = vpop.f32.mrf.mxu0
  %v3034 = vadd.f32 %v2233, %v3033
  %3035 = vmatprep.mubr.bf16.mxu0 %v674
  %3036 = vmatmul.mubr.bf16.gmra.mxu0 %v672
  %v3037 = vpop.f32.mrf.mxu0
  %v3038 = vadd.f32 %v2237, %v3037
  %v3039 = vpop.f32.mrf.mxu0
  %v3040 = vadd.f32 %v2239, %v3039
  %v3041 = vpop.f32.mrf.mxu0
  %v3042 = vadd.f32 %v2241, %v3041
  %v3043 = vpop.f32.mrf.mxu0
  %v3044 = vadd.f32 %v2243, %v3043
  %3045 = vmatprep.mubr.bf16.mxu0 %v676
  %3046 = vmatmul.mubr.bf16.gmra.mxu0 %v674
  %v3047 = vpop.f32.mrf.mxu0
  %v3048 = vadd.f32 %v2247, %v3047
  %v3049 = vpop.f32.mrf.mxu0
  %v3050 = vadd.f32 %v2249, %v3049
  %v3051 = vpop.f32.mrf.mxu0
  %v3052 = vadd.f32 %v2251, %v3051
  %v3053 = vpop.f32.mrf.mxu0
  %v3054 = vadd.f32 %v2253, %v3053
  %3055 = vmatprep.mubr.bf16.mxu0 %v679
  %3056 = vmatmul.mubr.bf16.gmra.mxu0 %v678
  %v3057 = vpop.f32.mrf.mxu0
  %v3058 = vadd.f32 %v2257, %v3057
  %v3059 = vpop.f32.mrf.mxu0
  %v3060 = vadd.f32 %v2259, %v3059
  %v3061 = vpop.f32.mrf.mxu0
  %v3062 = vadd.f32 %v2261, %v3061
  %v3063 = vpop.f32.mrf.mxu0
  %v3064 = vadd.f32 %v2263, %v3063
  %3065 = vmatprep.mubr.bf16.mxu0 %v681
  %3066 = vmatmul.mubr.bf16.gmra.mxu0 %v679
  %v3067 = vpop.f32.mrf.mxu0
  %v3068 = vadd.f32 %v2267, %v3067
  %v3069 = vpop.f32.mrf.mxu0
  %v3070 = vadd.f32 %v2269, %v3069
  %v3071 = vpop.f32.mrf.mxu0
  %v3072 = vadd.f32 %v2271, %v3071
  %v3073 = vpop.f32.mrf.mxu0
  %v3074 = vadd.f32 %v2273, %v3073
  %3075 = vmatprep.mubr.bf16.mxu0 %v683
  %3076 = vmatmul.mubr.bf16.gmra.mxu0 %v681
  %v3077 = vpop.f32.mrf.mxu0
  %v3078 = vadd.f32 %v2277, %v3077
  %v3079 = vpop.f32.mrf.mxu0
  %v3080 = vadd.f32 %v2279, %v3079
  %v3081 = vpop.f32.mrf.mxu0
  %v3082 = vadd.f32 %v2281, %v3081
  %v3083 = vpop.f32.mrf.mxu0
  %v3084 = vadd.f32 %v2283, %v3083
  %3085 = vmatprep.mubr.bf16.mxu0 %v685
  %3086 = vmatmul.mubr.bf16.gmra.mxu0 %v683
  %v3087 = vpop.f32.mrf.mxu0
  %v3088 = vadd.f32 %v2287, %v3087
  %v3089 = vpop.f32.mrf.mxu0
  %v3090 = vadd.f32 %v2289, %v3089
  %v3091 = vpop.f32.mrf.mxu0
  %v3092 = vadd.f32 %v2291, %v3091
  %v3093 = vpop.f32.mrf.mxu0
  %v3094 = vadd.f32 %v2293, %v3093
  %3095 = vmatprep.mubr.bf16.mxu0 %v687
  %3096 = vmatmul.mubr.bf16.gmra.mxu0 %v685
  %v3097 = vpop.f32.mrf.mxu0
  %v3098 = vadd.f32 %v2297, %v3097
  %v3099 = vpop.f32.mrf.mxu0
  %v3100 = vadd.f32 %v2299, %v3099
  %v3101 = vpop.f32.mrf.mxu0
  %v3102 = vadd.f32 %v2301, %v3101
  %v3103 = vpop.f32.mrf.mxu0
  %v3104 = vadd.f32 %v2303, %v3103
  %3105 = vmatprep.mubr.bf16.mxu0 %v689
  %3106 = vmatmul.mubr.bf16.gmra.mxu0 %v687
  %v3107 = vpop.f32.mrf.mxu0
  %v3108 = vadd.f32 %v2307, %v3107
  %v3109 = vpop.f32.mrf.mxu0
  %v3110 = vadd.f32 %v2309, %v3109
  %v3111 = vpop.f32.mrf.mxu0
  %v3112 = vadd.f32 %v2311, %v3111
  %v3113 = vpop.f32.mrf.mxu0
  %v3114 = vadd.f32 %v2313, %v3113
  %3115 = vdwg.mxu0
  %3116 = vmatprep.subr.bf16.mxu0 0
  %3117 = vmatpush1.bf16.msra.mxu0 0
  %3118 = vmatprep.subr.bf16.mxu0 0
  %3119 = vmatpush1.bf16.msra.mxu0 0
  %3120 = vmatprep.subr.bf16.mxu0 0
  %3121 = vmatpush1.bf16.msra.mxu0 0
  %3122 = vmatprep.subr.bf16.mxu0 0
  %3123 = vmatpush1.bf16.msra.mxu0 0
  %3124 = vmatprep.subr.bf16.mxu0 0
  %3125 = vmatpush1.bf16.msra.mxu0 0
  %3126 = vmatprep.subr.bf16.mxu0 0
  %3127 = vmatpush1.bf16.msra.mxu0 0
  %3128 = vmatprep.subr.bf16.mxu0 %v1252
  %3129 = vmatpush1.bf16.msra.mxu0 %v1251
  %3130 = vmatprep.subr.bf16.mxu0 %v1246
  %3131 = vmatpush1.bf16.msra.mxu0 %v1245
  %3132 = vmatprep.subr.bf16.mxu0 0
  %3133 = vmatpush2.bf16.msra.mxu0 0
  %3134 = vmatprep.subr.bf16.mxu0 0
  %3135 = vmatpush2.bf16.msra.mxu0 0
  %3136 = vmatprep.subr.bf16.mxu0 0
  %3137 = vmatpush2.bf16.msra.mxu0 0
  %3138 = vmatprep.subr.bf16.mxu0 0
  %3139 = vmatpush2.bf16.msra.mxu0 0
  %3140 = vmatprep.subr.bf16.mxu0 0
  %3141 = vmatpush2.bf16.msra.mxu0 0
  %3142 = vmatprep.subr.bf16.mxu0 0
  %3143 = vmatpush2.bf16.msra.mxu0 0
  %3144 = vmatprep.subr.bf16.mxu0 0
  %3145 = vmatpush2.bf16.msra.mxu0 0
  %3146 = vmatprep.subr.bf16.mxu0 0
  %3147 = vmatpush2.bf16.msra.mxu0 0
  %3148 = vmatprep.mubr.bf16.mxu0 0
  %3149 = vmatmul.mubr.bf16.gmra.mxu0 %v2316
  %v3150 = vpop.f32.mrf.mxu0
  %v3151 = vadd.f32 %v2998, %v3150
  %v3152 = vpop.f32.mrf.mxu0
  %v3153 = vadd.f32 %v3000, %v3152
  %v3154 = vpop.f32.mrf.mxu0
  %v3155 = vadd.f32 %v3002, %v3154
  %v3156 = vpop.f32.mrf.mxu0
  %v3157 = vadd.f32 %v3004, %v3156
  %3158 = vmatprep.mubr.bf16.mxu0 0
  %3159 = vmatmul.mubr.bf16.gmra.mxu0 %v2319
  %v3160 = vpop.f32.mrf.mxu0
  %v3161 = vadd.f32 %v3008, %v3160
  %v3162 = vpop.f32.mrf.mxu0
  %v3163 = vadd.f32 %v3010, %v3162
  %v3164 = vpop.f32.mrf.mxu0
  %v3165 = vadd.f32 %v3012, %v3164
  %v3166 = vpop.f32.mrf.mxu0
  %v3167 = vadd.f32 %v3014, %v3166
  %3168 = vmatprep.mubr.bf16.mxu0 0
  %3169 = vmatmul.mubr.bf16.gmra.mxu0 %v2322
  %v3170 = vpop.f32.mrf.mxu0
  %v3171 = vadd.f32 %v3018, %v3170
  %v3172 = vpop.f32.mrf.mxu0
  %v3173 = vadd.f32 %v3020, %v3172
  %v3174 = vpop.f32.mrf.mxu0
  %v3175 = vadd.f32 %v3022, %v3174
  %v3176 = vpop.f32.mrf.mxu0
  %v3177 = vadd.f32 %v3024, %v3176
  %3178 = vmatprep.mubr.bf16.mxu0 0
  %3179 = vmatmul.mubr.bf16.gmra.mxu0 %v2325
  %v3180 = vpop.f32.mrf.mxu0
  %v3181 = vadd.f32 %v3028, %v3180
  %v3182 = vpop.f32.mrf.mxu0
  %v3183 = vadd.f32 %v3030, %v3182
  %v3184 = vpop.f32.mrf.mxu0
  %v3185 = vadd.f32 %v3032, %v3184
  %v3186 = vpop.f32.mrf.mxu0
  %v3187 = vadd.f32 %v3034, %v3186
  %3188 = vmatprep.mubr.bf16.mxu0 0
  %3189 = vmatmul.mubr.bf16.gmra.mxu0 %v2328
  %v3190 = vpop.f32.mrf.mxu0
  %v3191 = vadd.f32 %v3038, %v3190
  %v3192 = vpop.f32.mrf.mxu0
  %v3193 = vadd.f32 %v3040, %v3192
  %v3194 = vpop.f32.mrf.mxu0
  %v3195 = vadd.f32 %v3042, %v3194
  %v3196 = vpop.f32.mrf.mxu0
  %v3197 = vadd.f32 %v3044, %v3196
  %3198 = vmatprep.mubr.bf16.mxu0 0
  %3199 = vmatmul.mubr.bf16.gmra.mxu0 %v2331
  %v3200 = vpop.f32.mrf.mxu0
  %v3201 = vadd.f32 %v3048, %v3200
  %v3202 = vpop.f32.mrf.mxu0
  %v3203 = vadd.f32 %v3050, %v3202
  %v3204 = vpop.f32.mrf.mxu0
  %v3205 = vadd.f32 %v3052, %v3204
  %v3206 = vpop.f32.mrf.mxu0
  %v3207 = vadd.f32 %v3054, %v3206
  %3208 = vmatprep.mubr.bf16.mxu0 0
  %3209 = vmatmul.mubr.bf16.gmra.mxu0 %v2334
  %v3210 = vpop.f32.mrf.mxu0
  %v3211 = vadd.f32 %v3058, %v3210
  %v3212 = vpop.f32.mrf.mxu0
  %v3213 = vadd.f32 %v3060, %v3212
  %v3214 = vpop.f32.mrf.mxu0
  %v3215 = vadd.f32 %v3062, %v3214
  %v3216 = vpop.f32.mrf.mxu0
  %v3217 = vadd.f32 %v3064, %v3216
  %3218 = vmatprep.mubr.bf16.mxu0 0
  %3219 = vmatmul.mubr.bf16.gmra.mxu0 %v2337
  %v3220 = vpop.f32.mrf.mxu0
  %v3221 = vadd.f32 %v3068, %v3220
  %v3222 = vpop.f32.mrf.mxu0
  %v3223 = vadd.f32 %v3070, %v3222
  %v3224 = vpop.f32.mrf.mxu0
  %v3225 = vadd.f32 %v3072, %v3224
  %v3226 = vpop.f32.mrf.mxu0
  %v3227 = vadd.f32 %v3074, %v3226
  %3228 = vmatprep.mubr.bf16.mxu0 0
  %3229 = vmatmul.mubr.bf16.gmra.mxu0 %v2340
  %v3230 = vpop.f32.mrf.mxu0
  %v3231 = vadd.f32 %v3078, %v3230
  %v3232 = vpop.f32.mrf.mxu0
  %v3233 = vadd.f32 %v3080, %v3232
  %v3234 = vpop.f32.mrf.mxu0
  %v3235 = vadd.f32 %v3082, %v3234
  %v3236 = vpop.f32.mrf.mxu0
  %v3237 = vadd.f32 %v3084, %v3236
  %3238 = vmatprep.mubr.bf16.mxu0 0
  %3239 = vmatmul.mubr.bf16.gmra.mxu0 %v2343
  %v3240 = vpop.f32.mrf.mxu0
  %v3241 = vadd.f32 %v3088, %v3240
  %v3242 = vpop.f32.mrf.mxu0
  %v3243 = vadd.f32 %v3090, %v3242
  %v3244 = vpop.f32.mrf.mxu0
  %v3245 = vadd.f32 %v3092, %v3244
  %v3246 = vpop.f32.mrf.mxu0
  %v3247 = vadd.f32 %v3094, %v3246
  %3248 = vmatprep.mubr.bf16.mxu0 0
  %3249 = vmatmul.mubr.bf16.gmra.mxu0 %v2346
  %v3250 = vpop.f32.mrf.mxu0
  %v3251 = vadd.f32 %v3098, %v3250
  %v3252 = vpop.f32.mrf.mxu0
  %v3253 = vadd.f32 %v3100, %v3252
  %v3254 = vpop.f32.mrf.mxu0
  %v3255 = vadd.f32 %v3102, %v3254
  %v3256 = vpop.f32.mrf.mxu0
  %v3257 = vadd.f32 %v3104, %v3256
  %3258 = vmatprep.mubr.bf16.mxu0 0
  %3259 = vmatmul.mubr.bf16.gmra.mxu0 %v2349
  %v3260 = vpop.f32.mrf.mxu0
  %v3261 = vadd.f32 %v3108, %v3260
  %v3262 = vpop.f32.mrf.mxu0
  %v3263 = vadd.f32 %v3110, %v3262
  %v3264 = vpop.f32.mrf.mxu0
  %v3265 = vadd.f32 %v3112, %v3264
  %v3266 = vpop.f32.mrf.mxu0
  %v3267 = vadd.f32 %v3114, %v3266
  %3268 = vdwg.mxu0
  %v3377 = vunpack.c.l.b16 %v557
  %v3378 = vunpack.c.h.b16 %v557
  %v3379 = vunpack.c.l.b16 %v558
  %v3380 = vunpack.c.h.b16 %v558
  %v3381 = vunpack.c.l.b16 %v559
  %v3382 = vunpack.c.h.b16 %v559
  %v3383 = vunpack.c.l.b16 %v560
  %v3384 = vunpack.c.h.b16 %v560
  %v3385 = vunpack.c.l.b16 %v561
  %v3386 = vunpack.c.h.b16 %v561
  %v3387 = vunpack.c.l.b16 %v562
  %v3388 = vunpack.c.h.b16 %v562
  %v3389 = vunpack.c.l.b16 %v563
  %v3390 = vunpack.c.h.b16 %v563
  %v3391 = vunpack.c.l.b16 %v564
  %v3392 = vunpack.c.h.b16 %v564
  %v3393 = vunpack.c.l.b16 %v565
  %v3394 = vunpack.c.h.b16 %v565
  %v3395 = vunpack.c.l.b16 %v566
  %v3396 = vunpack.c.h.b16 %v566
  %v3397 = vunpack.c.l.b16 %v567
  %v3398 = vunpack.c.h.b16 %v567
  %v3399 = vunpack.c.l.b16 %v568
  %v3400 = vunpack.c.h.b16 %v568
  %v3401 = vunpack.c.l.b16 %v569
  %v3402 = vunpack.c.h.b16 %v569
  %v3403 = vunpack.c.l.b16 %v570
  %v3404 = vunpack.c.h.b16 %v570
  %v3405 = vunpack.c.l.b16 %v571
  %v3406 = vunpack.c.h.b16 %v571
  %v3407 = vunpack.c.l.b16 %v572
  %v3408 = vunpack.c.h.b16 %v572
  %v3409 = vunpack.c.l.b16 %v573
  %v3410 = vunpack.c.h.b16 %v573
  %v3411 = vunpack.c.l.b16 %v574
  %v3412 = vunpack.c.h.b16 %v574
  %v3413 = vunpack.c.l.b16 %v575
  %v3414 = vunpack.c.h.b16 %v575
  %v3415 = vunpack.c.l.b16 %v576
  %v3416 = vunpack.c.h.b16 %v576
  %v3417 = vunpack.c.l.b16 %v577
  %v3418 = vunpack.c.h.b16 %v577
  %v3419 = vunpack.c.l.b16 %v578
  %v3420 = vunpack.c.h.b16 %v578
  %v3421 = vunpack.c.l.b16 %v579
  %v3422 = vunpack.c.h.b16 %v579
  %v3423 = vunpack.c.l.b16 %v580
  %v3424 = vunpack.c.h.b16 %v580
  %v3425 = vunpack.c.l.b16 %v581
  %v3426 = vunpack.c.h.b16 %v581
  %v3427 = vunpack.c.l.b16 %v582
  %v3428 = vunpack.c.h.b16 %v582
  %v3429 = vunpack.c.l.b16 %v583
  %v3430 = vunpack.c.h.b16 %v583
  %v3431 = vunpack.c.l.b16 %v584
  %v3432 = vunpack.c.h.b16 %v584
  %v3433 = vunpack.c.l.b16 %v585
  %v3434 = vunpack.c.h.b16 %v585
  %v3435 = vunpack.c.l.b16 %v586
  %v3436 = vunpack.c.h.b16 %v586
  %v3437 = vunpack.c.l.b16 %v587
  %v3438 = vunpack.c.h.b16 %v587
  %v3439 = vunpack.c.l.b16 %v588
  %v3440 = vunpack.c.h.b16 %v588
  %v3441 = vunpack.c.l.b16 %v589
  %v3442 = vunpack.c.h.b16 %v589
  %v3443 = vunpack.c.l.b16 %v590
  %v3444 = vunpack.c.h.b16 %v590
  %v3445 = vunpack.c.l.b16 %v591
  %v3446 = vunpack.c.h.b16 %v591
  %v3447 = vunpack.c.l.b16 %v592
  %v3448 = vunpack.c.h.b16 %v592
  %v3449 = vunpack.c.l.b16 %v593
  %v3450 = vunpack.c.h.b16 %v593
  %v3451 = vunpack.c.l.b16 %v594
  %v3452 = vunpack.c.h.b16 %v594
  %v3453 = vunpack.c.l.b16 %v595
  %v3454 = vunpack.c.h.b16 %v595
  %v3455 = vunpack.c.l.b16 %v596
  %v3456 = vunpack.c.h.b16 %v596
  %v3457 = vunpack.c.l.b16 %v597
  %v3458 = vunpack.c.h.b16 %v597
  %v3459 = vunpack.c.l.b16 %v598
  %v3460 = vunpack.c.h.b16 %v598
  %v3461 = vunpack.c.l.b16 %v599
  %v3462 = vunpack.c.h.b16 %v599
  %v3463 = vunpack.c.l.b16 %v600
  %v3464 = vunpack.c.h.b16 %v600
  %v3465 = vunpack.c.l.b16 %v601
  %v3466 = vunpack.c.h.b16 %v601
  %v3467 = vunpack.c.l.b16 %v602
  %v3468 = vunpack.c.h.b16 %v602
  %v3469 = vunpack.c.l.b16 %v603
  %v3470 = vunpack.c.h.b16 %v603
  %v3471 = vunpack.c.l.b16 %v604
  %v3472 = vunpack.c.h.b16 %v604
  %v3473 = vunpack.c.l.b16 %v605
  %v3474 = vunpack.c.h.b16 %v605
  %v3475 = vunpack.c.l.b16 %v606
  %v3476 = vunpack.c.h.b16 %v606
  %v3477 = vunpack.c.l.b16 %v607
  %v3478 = vunpack.c.h.b16 %v607
  %v3479 = vunpack.c.l.b16 %v608
  %v3480 = vunpack.c.h.b16 %v608
  %v3481 = vunpack.c.l.b16 %v609
  %v3482 = vunpack.c.h.b16 %v609
  %v3483 = vunpack.c.l.b16 %v610
  %v3484 = vunpack.c.h.b16 %v610
  %v3485 = vunpack.c.l.b16 %v611
  %v3486 = vunpack.c.h.b16 %v611
  %v3487 = vunpack.c.l.b16 %v612
  %v3488 = vunpack.c.h.b16 %v612
  %v3489 = vunpack.c.l.b16 %v613
  %v3490 = vunpack.c.h.b16 %v613
  %v3491 = vunpack.c.l.b16 %v614
  %v3492 = vunpack.c.h.b16 %v614
  %v3493 = vunpack.c.l.b16 %v615
  %v3494 = vunpack.c.h.b16 %v615
  %v3495 = vunpack.c.l.b16 %v616
  %v3496 = vunpack.c.h.b16 %v616
  %v3497 = vunpack.c.l.b16 %v617
  %v3498 = vunpack.c.h.b16 %v617
  %v3499 = vunpack.c.l.b16 %v618
  %v3500 = vunpack.c.h.b16 %v618
  %v3501 = vunpack.c.l.b16 %v619
  %v3502 = vunpack.c.h.b16 %v619
  %v3503 = vunpack.c.l.b16 %v620
  %v3504 = vunpack.c.h.b16 %v620
  %v3505 = vunpack.c.l.b16 %v621
  %v3506 = vunpack.c.h.b16 %v621
  %v3507 = vunpack.c.l.b16 %v622
  %v3508 = vunpack.c.h.b16 %v622
  %v3509 = vunpack.c.l.b16 %v623
  %v3510 = vunpack.c.h.b16 %v623
  %v3511 = vunpack.c.l.b16 %v624
  %v3512 = vunpack.c.h.b16 %v624
  %v3513 = vunpack.c.l.b16 %v625
  %v3514 = vunpack.c.h.b16 %v625
  %v3515 = vunpack.c.l.b16 %v626
  %v3516 = vunpack.c.h.b16 %v626
  %v3517 = vunpack.c.l.b16 %v627
  %v3518 = vunpack.c.h.b16 %v627
  %v3519 = vunpack.c.l.b16 %v628
  %v3520 = vunpack.c.h.b16 %v628
  %v3521 = vunpack.c.l.b16 %v629
  %v3522 = vunpack.c.h.b16 %v629
  %v3523 = vunpack.c.l.b16 %v630
  %v3524 = vunpack.c.h.b16 %v630
  %v3525 = vunpack.c.l.b16 %v631
  %v3526 = vunpack.c.h.b16 %v631
  %v3527 = vunpack.c.l.b16 %v632
  %v3528 = vunpack.c.h.b16 %v632
  %v3529 = vunpack.c.l.b16 %v633
  %v3530 = vunpack.c.h.b16 %v633
  %v3531 = vunpack.c.l.b16 %v634
  %v3532 = vunpack.c.h.b16 %v634
  %v3533 = vunpack.c.l.b16 %v635
  %v3534 = vunpack.c.h.b16 %v635
  %v3535 = vunpack.c.l.b16 %v636
  %v3536 = vunpack.c.h.b16 %v636
  %v3537 = vunpack.c.l.b16 %v637
  %v3538 = vunpack.c.h.b16 %v637
  %v3539 = vunpack.c.l.b16 %v638
  %v3540 = vunpack.c.h.b16 %v638
  %v3541 = vunpack.c.l.b16 %v639
  %v3542 = vunpack.c.h.b16 %v639
  %v3543 = vunpack.c.l.b16 %v640
  %v3544 = vunpack.c.h.b16 %v640
  %v3545 = vunpack.c.l.b16 %v641
  %v3546 = vunpack.c.h.b16 %v641
  %v3547 = vunpack.c.l.b16 %v642
  %v3548 = vunpack.c.h.b16 %v642
  %v3549 = vunpack.c.l.b16 %v643
  %v3550 = vunpack.c.h.b16 %v643
  %v3551 = vunpack.c.l.b16 %v644
  %v3552 = vunpack.c.h.b16 %v644
  %v3553 = vunpack.c.l.b16 %v645
  %v3554 = vunpack.c.h.b16 %v645
  %v3555 = vunpack.c.l.b16 %v646
  %v3556 = vunpack.c.h.b16 %v646
  %v3557 = vunpack.c.l.b16 %v647
  %v3558 = vunpack.c.h.b16 %v647
  %v3559 = vunpack.c.l.b16 %v648
  %v3560 = vunpack.c.h.b16 %v648
  %v3561 = vunpack.c.l.b16 %v649
  %v3562 = vunpack.c.h.b16 %v649
  %v3563 = vunpack.c.l.b16 %v650
  %v3564 = vunpack.c.h.b16 %v650
  %v3565 = vunpack.c.l.b16 %v651
  %v3566 = vunpack.c.h.b16 %v651
  %v3567 = vunpack.c.l.b16 %v652
  %v3568 = vunpack.c.h.b16 %v652
  %v3569 = vunpack.c.l.b16 %v653
  %v3570 = vunpack.c.h.b16 %v653
  %v3571 = vunpack.c.l.b16 %v654
  %v3572 = vunpack.c.h.b16 %v654
  %v3573 = vunpack.c.l.b16 %v655
  %v3574 = vunpack.c.h.b16 %v655
  %v3575 = vunpack.c.l.b16 %v656
  %v3576 = vunpack.c.h.b16 %v656
  %v3577 = vunpack.c.l.b16 %v657
  %v3578 = vunpack.c.h.b16 %v657
  %v3579 = vunpack.c.l.b16 %v658
  %v3580 = vunpack.c.h.b16 %v658
  %v3581 = vunpack.c.l.b16 %v659
  %v3582 = vunpack.c.h.b16 %v659
  %v3583 = vunpack.c.l.b16 %v660
  %v3584 = vunpack.c.h.b16 %v660
  %v3585 = vunpack.c.l.b16 %v661
  %v3586 = vunpack.c.h.b16 %v661
  %v3587 = vunpack.c.l.b16 %v662
  %v3588 = vunpack.c.h.b16 %v662
  %v3589 = vunpack.c.l.b16 %v663
  %v3590 = vunpack.c.h.b16 %v663
  %v3591 = vunpack.c.l.b16 %v664
  %v3592 = vunpack.c.h.b16 %v664
  %v3593 = vpack.c.b16 %v3383, %v3377
  %v3594 = vpack.c.b16 %v3384, %v3378
  %v3595 = vpack.c.b16 %v3385, %v3379
  %v3596 = vpack.c.b16 %v3386, %v3380
  %v3597 = vpack.c.b16 %v3387, %v3381
  %v3598 = vpack.c.b16 %v3388, %v3382
  %v3599 = vpack.c.b16 %v3395, %v3389
  %v3600 = vpack.c.b16 %v3396, %v3390
  %v3601 = vpack.c.b16 %v3397, %v3391
  %v3602 = vpack.c.b16 %v3398, %v3392
  %v3603 = vpack.c.b16 %v3399, %v3393
  %v3604 = vpack.c.b16 %v3400, %v3394
  %v3605 = vpack.c.b16 %v3407, %v3401
  %v3606 = vpack.c.b16 %v3408, %v3402
  %v3607 = vpack.c.b16 %v3409, %v3403
  %v3608 = vpack.c.b16 %v3410, %v3404
  %v3609 = vpack.c.b16 %v3411, %v3405
  %v3610 = vpack.c.b16 %v3412, %v3406
  %v3611 = vpack.c.b16 %v3419, %v3413
  %v3612 = vpack.c.b16 %v3420, %v3414
  %v3613 = vpack.c.b16 %v3421, %v3415
  %v3614 = vpack.c.b16 %v3422, %v3416
  %v3615 = vpack.c.b16 %v3423, %v3417
  %v3616 = vpack.c.b16 %v3424, %v3418
  %v3617 = vpack.c.b16 %v3431, %v3425
  %v3618 = vpack.c.b16 %v3432, %v3426
  %v3619 = vpack.c.b16 %v3433, %v3427
  %v3620 = vpack.c.b16 %v3434, %v3428
  %v3621 = vpack.c.b16 %v3435, %v3429
  %v3622 = vpack.c.b16 %v3436, %v3430
  %v3623 = vpack.c.b16 %v3443, %v3437
  %v3624 = vpack.c.b16 %v3444, %v3438
  %v3625 = vpack.c.b16 %v3445, %v3439
  %v3626 = vpack.c.b16 %v3446, %v3440
  %v3627 = vpack.c.b16 %v3447, %v3441
  %v3628 = vpack.c.b16 %v3448, %v3442
  %v3629 = vpack.c.b16 %v3455, %v3449
  %v3630 = vpack.c.b16 %v3456, %v3450
  %v3631 = vpack.c.b16 %v3457, %v3451
  %v3632 = vpack.c.b16 %v3458, %v3452
  %v3633 = vpack.c.b16 %v3459, %v3453
  %v3634 = vpack.c.b16 %v3460, %v3454
  %v3635 = vpack.c.b16 %v3467, %v3461
  %v3636 = vpack.c.b16 %v3468, %v3462
  %v3637 = vpack.c.b16 %v3469, %v3463
  %v3638 = vpack.c.b16 %v3470, %v3464
  %v3639 = vpack.c.b16 %v3471, %v3465
  %v3640 = vpack.c.b16 %v3472, %v3466
  %v3641 = vpack.c.b16 %v3479, %v3473
  %v3642 = vpack.c.b16 %v3480, %v3474
  %v3643 = vpack.c.b16 %v3481, %v3475
  %v3644 = vpack.c.b16 %v3482, %v3476
  %v3645 = vpack.c.b16 %v3483, %v3477
  %v3646 = vpack.c.b16 %v3484, %v3478
  %v3647 = vpack.c.b16 %v3491, %v3485
  %v3648 = vpack.c.b16 %v3492, %v3486
  %v3649 = vpack.c.b16 %v3493, %v3487
  %v3650 = vpack.c.b16 %v3494, %v3488
  %v3651 = vpack.c.b16 %v3495, %v3489
  %v3652 = vpack.c.b16 %v3496, %v3490
  %v3653 = vpack.c.b16 %v3503, %v3497
  %v3654 = vpack.c.b16 %v3504, %v3498
  %v3655 = vpack.c.b16 %v3505, %v3499
  %v3656 = vpack.c.b16 %v3506, %v3500
  %v3657 = vpack.c.b16 %v3507, %v3501
  %v3658 = vpack.c.b16 %v3508, %v3502
  %v3659 = vpack.c.b16 %v3515, %v3509
  %v3660 = vpack.c.b16 %v3516, %v3510
  %v3661 = vpack.c.b16 %v3517, %v3511
  %v3662 = vpack.c.b16 %v3518, %v3512
  %v3663 = vpack.c.b16 %v3519, %v3513
  %v3664 = vpack.c.b16 %v3520, %v3514
  %v3665 = vpack.c.b16 %v3527, %v3521
  %v3666 = vpack.c.b16 %v3528, %v3522
  %v3667 = vpack.c.b16 %v3529, %v3523
  %v3668 = vpack.c.b16 %v3530, %v3524
  %v3669 = vpack.c.b16 %v3531, %v3525
  %v3670 = vpack.c.b16 %v3532, %v3526
  %v3671 = vpack.c.b16 %v3539, %v3533
  %v3672 = vpack.c.b16 %v3540, %v3534
  %v3673 = vpack.c.b16 %v3541, %v3535
  %v3674 = vpack.c.b16 %v3542, %v3536
  %v3675 = vpack.c.b16 %v3543, %v3537
  %v3676 = vpack.c.b16 %v3544, %v3538
  %v3677 = vpack.c.b16 %v3551, %v3545
  %v3678 = vpack.c.b16 %v3552, %v3546
  %v3679 = vpack.c.b16 %v3553, %v3547
  %v3680 = vpack.c.b16 %v3554, %v3548
  %v3681 = vpack.c.b16 %v3555, %v3549
  %v3682 = vpack.c.b16 %v3556, %v3550
  %v3683 = vpack.c.b16 %v3563, %v3557
  %v3684 = vpack.c.b16 %v3564, %v3558
  %v3685 = vpack.c.b16 %v3565, %v3559
  %v3686 = vpack.c.b16 %v3566, %v3560
  %v3687 = vpack.c.b16 %v3567, %v3561
  %v3688 = vpack.c.b16 %v3568, %v3562
  %v3689 = vpack.c.b16 %v3575, %v3569
  %v3690 = vpack.c.b16 %v3576, %v3570
  %v3691 = vpack.c.b16 %v3577, %v3571
  %v3692 = vpack.c.b16 %v3578, %v3572
  %v3693 = vpack.c.b16 %v3579, %v3573
  %v3694 = vpack.c.b16 %v3580, %v3574
  %v3695 = vpack.c.b16 %v3587, %v3581
  %v3696 = vpack.c.b16 %v3588, %v3582
  %v3697 = vpack.c.b16 %v3589, %v3583
  %v3698 = vpack.c.b16 %v3590, %v3584
  %v3699 = vpack.c.b16 %v3591, %v3585
  %v3700 = vpack.c.b16 %v3592, %v3586
  %3809 = vmatprep.subr.bf16.mxu0 %v3636
  %3810 = vmatpush1.bf16.msra.mxu0 %v3635
  %3811 = vmatprep.subr.bf16.mxu0 %v3630
  %3812 = vmatpush1.bf16.msra.mxu0 %v3629
  %3813 = vmatprep.subr.bf16.mxu0 %v3624
  %3814 = vmatpush1.bf16.msra.mxu0 %v3623
  %3815 = vmatprep.subr.bf16.mxu0 %v3618
  %3816 = vmatpush1.bf16.msra.mxu0 %v3617
  %3817 = vmatprep.subr.bf16.mxu0 %v3612
  %3818 = vmatpush1.bf16.msra.mxu0 %v3611
  %3819 = vmatprep.subr.bf16.mxu0 %v3606
  %3820 = vmatpush1.bf16.msra.mxu0 %v3605
  %3821 = vmatprep.subr.bf16.mxu0 %v3600
  %3822 = vmatpush1.bf16.msra.mxu0 %v3599
  %3823 = vmatprep.subr.bf16.mxu0 %v3594
  %3824 = vmatpush1.bf16.msra.mxu0 %v3593
  %3825 = vmatprep.subr.bf16.mxu0 %v3684
  %3826 = vmatpush2.bf16.msra.mxu0 %v3683
  %3827 = vmatprep.subr.bf16.mxu0 %v3678
  %3828 = vmatpush2.bf16.msra.mxu0 %v3677
  %3829 = vmatprep.subr.bf16.mxu0 %v3672
  %3830 = vmatpush2.bf16.msra.mxu0 %v3671
  %3831 = vmatprep.subr.bf16.mxu0 %v3666
  %3832 = vmatpush2.bf16.msra.mxu0 %v3665
  %3833 = vmatprep.subr.bf16.mxu0 %v3660
  %3834 = vmatpush2.bf16.msra.mxu0 %v3659
  %3835 = vmatprep.subr.bf16.mxu0 %v3654
  %3836 = vmatpush2.bf16.msra.mxu0 %v3653
  %3837 = vmatprep.subr.bf16.mxu0 %v3648
  %3838 = vmatpush2.bf16.msra.mxu0 %v3647
  %3839 = vmatprep.subr.bf16.mxu0 %v3642
  %3840 = vmatpush2.bf16.msra.mxu0 %v3641
  %3841 = vmatprep.mubr.bf16.mxu0 %v666
  %3842 = vmatmul.mubr.bf16.gmra.mxu0 %v665
  %v3843 = vpop.f32.mrf.mxu0
  %v3844 = vadd.f32 0.0, %v3843
  %v3845 = vpop.f32.mrf.mxu0
  %v3846 = vadd.f32 0.0, %v3845
  %v3847 = vpop.f32.mrf.mxu0
  %v3848 = vadd.f32 0.0, %v3847
  %v3849 = vpop.f32.mrf.mxu0
  %v3850 = vadd.f32 0.0, %v3849
  %3851 = vmatprep.mubr.bf16.mxu0 %v668
  %3852 = vmatmul.mubr.bf16.gmra.mxu0 %v666
  %v3853 = vpop.f32.mrf.mxu0
  %v3854 = vadd.f32 0.0, %v3853
  %v3855 = vpop.f32.mrf.mxu0
  %v3856 = vadd.f32 0.0, %v3855
  %v3857 = vpop.f32.mrf.mxu0
  %v3858 = vadd.f32 0.0, %v3857
  %v3859 = vpop.f32.mrf.mxu0
  %v3860 = vadd.f32 0.0, %v3859
  %3861 = vmatprep.mubr.bf16.mxu0 %v670
  %3862 = vmatmul.mubr.bf16.gmra.mxu0 %v668
  %v3863 = vpop.f32.mrf.mxu0
  %v3864 = vadd.f32 0.0, %v3863
  %v3865 = vpop.f32.mrf.mxu0
  %v3866 = vadd.f32 0.0, %v3865
  %v3867 = vpop.f32.mrf.mxu0
  %v3868 = vadd.f32 0.0, %v3867
  %v3869 = vpop.f32.mrf.mxu0
  %v3870 = vadd.f32 0.0, %v3869
  %3871 = vmatprep.mubr.bf16.mxu0 %v672
  %3872 = vmatmul.mubr.bf16.gmra.mxu0 %v670
  %v3873 = vpop.f32.mrf.mxu0
  %v3874 = vadd.f32 0.0, %v3873
  %v3875 = vpop.f32.mrf.mxu0
  %v3876 = vadd.f32 0.0, %v3875
  %v3877 = vpop.f32.mrf.mxu0
  %v3878 = vadd.f32 0.0, %v3877
  %v3879 = vpop.f32.mrf.mxu0
  %v3880 = vadd.f32 0.0, %v3879
  %3881 = vmatprep.mubr.bf16.mxu0 %v674
  %3882 = vmatmul.mubr.bf16.gmra.mxu0 %v672
  %v3883 = vpop.f32.mrf.mxu0
  %v3884 = vadd.f32 0.0, %v3883
  %v3885 = vpop.f32.mrf.mxu0
  %v3886 = vadd.f32 0.0, %v3885
  %v3887 = vpop.f32.mrf.mxu0
  %v3888 = vadd.f32 0.0, %v3887
  %v3889 = vpop.f32.mrf.mxu0
  %v3890 = vadd.f32 0.0, %v3889
  %3891 = vmatprep.mubr.bf16.mxu0 %v676
  %3892 = vmatmul.mubr.bf16.gmra.mxu0 %v674
  %v3893 = vpop.f32.mrf.mxu0
  %v3894 = vadd.f32 0.0, %v3893
  %v3895 = vpop.f32.mrf.mxu0
  %v3896 = vadd.f32 0.0, %v3895
  %v3897 = vpop.f32.mrf.mxu0
  %v3898 = vadd.f32 0.0, %v3897
  %v3899 = vpop.f32.mrf.mxu0
  %v3900 = vadd.f32 0.0, %v3899
  %3901 = vmatprep.mubr.bf16.mxu0 %v679
  %3902 = vmatmul.mubr.bf16.gmra.mxu0 %v678
  %v3903 = vpop.f32.mrf.mxu0
  %v3904 = vadd.f32 0.0, %v3903
  %v3905 = vpop.f32.mrf.mxu0
  %v3906 = vadd.f32 0.0, %v3905
  %v3907 = vpop.f32.mrf.mxu0
  %v3908 = vadd.f32 0.0, %v3907
  %v3909 = vpop.f32.mrf.mxu0
  %v3910 = vadd.f32 0.0, %v3909
  %3911 = vmatprep.mubr.bf16.mxu0 %v681
  %3912 = vmatmul.mubr.bf16.gmra.mxu0 %v679
  %v3913 = vpop.f32.mrf.mxu0
  %v3914 = vadd.f32 0.0, %v3913
  %v3915 = vpop.f32.mrf.mxu0
  %v3916 = vadd.f32 0.0, %v3915
  %v3917 = vpop.f32.mrf.mxu0
  %v3918 = vadd.f32 0.0, %v3917
  %v3919 = vpop.f32.mrf.mxu0
  %v3920 = vadd.f32 0.0, %v3919
  %3921 = vmatprep.mubr.bf16.mxu0 %v683
  %3922 = vmatmul.mubr.bf16.gmra.mxu0 %v681
  %v3923 = vpop.f32.mrf.mxu0
  %v3924 = vadd.f32 0.0, %v3923
  %v3925 = vpop.f32.mrf.mxu0
  %v3926 = vadd.f32 0.0, %v3925
  %v3927 = vpop.f32.mrf.mxu0
  %v3928 = vadd.f32 0.0, %v3927
  %v3929 = vpop.f32.mrf.mxu0
  %v3930 = vadd.f32 0.0, %v3929
  %3931 = vmatprep.mubr.bf16.mxu0 %v685
  %3932 = vmatmul.mubr.bf16.gmra.mxu0 %v683
  %v3933 = vpop.f32.mrf.mxu0
  %v3934 = vadd.f32 0.0, %v3933
  %v3935 = vpop.f32.mrf.mxu0
  %v3936 = vadd.f32 0.0, %v3935
  %v3937 = vpop.f32.mrf.mxu0
  %v3938 = vadd.f32 0.0, %v3937
  %v3939 = vpop.f32.mrf.mxu0
  %v3940 = vadd.f32 0.0, %v3939
  %3941 = vmatprep.mubr.bf16.mxu0 %v687
  %3942 = vmatmul.mubr.bf16.gmra.mxu0 %v685
  %v3943 = vpop.f32.mrf.mxu0
  %v3944 = vadd.f32 0.0, %v3943
  %v3945 = vpop.f32.mrf.mxu0
  %v3946 = vadd.f32 0.0, %v3945
  %v3947 = vpop.f32.mrf.mxu0
  %v3948 = vadd.f32 0.0, %v3947
  %v3949 = vpop.f32.mrf.mxu0
  %v3950 = vadd.f32 0.0, %v3949
  %3951 = vmatprep.mubr.bf16.mxu0 %v689
  %3952 = vmatmul.mubr.bf16.gmra.mxu0 %v687
  %v3953 = vpop.f32.mrf.mxu0
  %v3954 = vadd.f32 0.0, %v3953
  %v3955 = vpop.f32.mrf.mxu0
  %v3956 = vadd.f32 0.0, %v3955
  %v3957 = vpop.f32.mrf.mxu0
  %v3958 = vadd.f32 0.0, %v3957
  %v3959 = vpop.f32.mrf.mxu0
  %v3960 = vadd.f32 0.0, %v3959
  %3961 = vdwg.mxu0
  %3962 = vmatprep.subr.bf16.mxu0 0
  %3963 = vmatpush1.bf16.msra.mxu0 0
  %3964 = vmatprep.subr.bf16.mxu0 0
  %3965 = vmatpush1.bf16.msra.mxu0 0
  %3966 = vmatprep.subr.bf16.mxu0 0
  %3967 = vmatpush1.bf16.msra.mxu0 0
  %3968 = vmatprep.subr.bf16.mxu0 0
  %3969 = vmatpush1.bf16.msra.mxu0 0
  %3970 = vmatprep.subr.bf16.mxu0 0
  %3971 = vmatpush1.bf16.msra.mxu0 0
  %3972 = vmatprep.subr.bf16.mxu0 0
  %3973 = vmatpush1.bf16.msra.mxu0 0
  %3974 = vmatprep.subr.bf16.mxu0 %v3696
  %3975 = vmatpush1.bf16.msra.mxu0 %v3695
  %3976 = vmatprep.subr.bf16.mxu0 %v3690
  %3977 = vmatpush1.bf16.msra.mxu0 %v3689
  %3978 = vmatprep.subr.bf16.mxu0 0
  %3979 = vmatpush2.bf16.msra.mxu0 0
  %3980 = vmatprep.subr.bf16.mxu0 0
  %3981 = vmatpush2.bf16.msra.mxu0 0
  %3982 = vmatprep.subr.bf16.mxu0 0
  %3983 = vmatpush2.bf16.msra.mxu0 0
  %3984 = vmatprep.subr.bf16.mxu0 0
  %3985 = vmatpush2.bf16.msra.mxu0 0
  %3986 = vmatprep.subr.bf16.mxu0 0
  %3987 = vmatpush2.bf16.msra.mxu0 0
  %3988 = vmatprep.subr.bf16.mxu0 0
  %3989 = vmatpush2.bf16.msra.mxu0 0
  %3990 = vmatprep.subr.bf16.mxu0 0
  %3991 = vmatpush2.bf16.msra.mxu0 0
  %3992 = vmatprep.subr.bf16.mxu0 0
  %3993 = vmatpush2.bf16.msra.mxu0 0
  %3994 = vmatprep.mubr.bf16.mxu0 0
  %3995 = vmatmul.mubr.bf16.gmra.mxu0 %v2316
  %v3996 = vpop.f32.mrf.mxu0
  %v3997 = vadd.f32 %v3844, %v3996
  %v3998 = vpop.f32.mrf.mxu0
  %v3999 = vadd.f32 %v3846, %v3998
  %v4000 = vpop.f32.mrf.mxu0
  %v4001 = vadd.f32 %v3848, %v4000
  %v4002 = vpop.f32.mrf.mxu0
  %v4003 = vadd.f32 %v3850, %v4002
  %4004 = vmatprep.mubr.bf16.mxu0 0
  %4005 = vmatmul.mubr.bf16.gmra.mxu0 %v2319
  %v4006 = vpop.f32.mrf.mxu0
  %v4007 = vadd.f32 %v3854, %v4006
  %v4008 = vpop.f32.mrf.mxu0
  %v4009 = vadd.f32 %v3856, %v4008
  %v4010 = vpop.f32.mrf.mxu0
  %v4011 = vadd.f32 %v3858, %v4010
  %v4012 = vpop.f32.mrf.mxu0
  %v4013 = vadd.f32 %v3860, %v4012
  %4014 = vmatprep.mubr.bf16.mxu0 0
  %4015 = vmatmul.mubr.bf16.gmra.mxu0 %v2322
  %v4016 = vpop.f32.mrf.mxu0
  %v4017 = vadd.f32 %v3864, %v4016
  %v4018 = vpop.f32.mrf.mxu0
  %v4019 = vadd.f32 %v3866, %v4018
  %v4020 = vpop.f32.mrf.mxu0
  %v4021 = vadd.f32 %v3868, %v4020
  %v4022 = vpop.f32.mrf.mxu0
  %v4023 = vadd.f32 %v3870, %v4022
  %4024 = vmatprep.mubr.bf16.mxu0 0
  %4025 = vmatmul.mubr.bf16.gmra.mxu0 %v2325
  %v4026 = vpop.f32.mrf.mxu0
  %v4027 = vadd.f32 %v3874, %v4026
  %v4028 = vpop.f32.mrf.mxu0
  %v4029 = vadd.f32 %v3876, %v4028
  %v4030 = vpop.f32.mrf.mxu0
  %v4031 = vadd.f32 %v3878, %v4030
  %v4032 = vpop.f32.mrf.mxu0
  %v4033 = vadd.f32 %v3880, %v4032
  %4034 = vmatprep.mubr.bf16.mxu0 0
  %4035 = vmatmul.mubr.bf16.gmra.mxu0 %v2328
  %v4036 = vpop.f32.mrf.mxu0
  %v4037 = vadd.f32 %v3884, %v4036
  %v4038 = vpop.f32.mrf.mxu0
  %v4039 = vadd.f32 %v3886, %v4038
  %v4040 = vpop.f32.mrf.mxu0
  %v4041 = vadd.f32 %v3888, %v4040
  %v4042 = vpop.f32.mrf.mxu0
  %v4043 = vadd.f32 %v3890, %v4042
  %4044 = vmatprep.mubr.bf16.mxu0 0
  %4045 = vmatmul.mubr.bf16.gmra.mxu0 %v2331
  %v4046 = vpop.f32.mrf.mxu0
  %v4047 = vadd.f32 %v3894, %v4046
  %v4048 = vpop.f32.mrf.mxu0
  %v4049 = vadd.f32 %v3896, %v4048
  %v4050 = vpop.f32.mrf.mxu0
  %v4051 = vadd.f32 %v3898, %v4050
  %v4052 = vpop.f32.mrf.mxu0
  %v4053 = vadd.f32 %v3900, %v4052
  %4054 = vmatprep.mubr.bf16.mxu0 0
  %4055 = vmatmul.mubr.bf16.gmra.mxu0 %v2334
  %v4056 = vpop.f32.mrf.mxu0
  %v4057 = vadd.f32 %v3904, %v4056
  %v4058 = vpop.f32.mrf.mxu0
  %v4059 = vadd.f32 %v3906, %v4058
  %v4060 = vpop.f32.mrf.mxu0
  %v4061 = vadd.f32 %v3908, %v4060
  %v4062 = vpop.f32.mrf.mxu0
  %v4063 = vadd.f32 %v3910, %v4062
  %4064 = vmatprep.mubr.bf16.mxu0 0
  %4065 = vmatmul.mubr.bf16.gmra.mxu0 %v2337
  %v4066 = vpop.f32.mrf.mxu0
  %v4067 = vadd.f32 %v3914, %v4066
  %v4068 = vpop.f32.mrf.mxu0
  %v4069 = vadd.f32 %v3916, %v4068
  %v4070 = vpop.f32.mrf.mxu0
  %v4071 = vadd.f32 %v3918, %v4070
  %v4072 = vpop.f32.mrf.mxu0
  %v4073 = vadd.f32 %v3920, %v4072
  %4074 = vmatprep.mubr.bf16.mxu0 0
  %4075 = vmatmul.mubr.bf16.gmra.mxu0 %v2340
  %v4076 = vpop.f32.mrf.mxu0
  %v4077 = vadd.f32 %v3924, %v4076
  %v4078 = vpop.f32.mrf.mxu0
  %v4079 = vadd.f32 %v3926, %v4078
  %v4080 = vpop.f32.mrf.mxu0
  %v4081 = vadd.f32 %v3928, %v4080
  %v4082 = vpop.f32.mrf.mxu0
  %v4083 = vadd.f32 %v3930, %v4082
  %4084 = vmatprep.mubr.bf16.mxu0 0
  %4085 = vmatmul.mubr.bf16.gmra.mxu0 %v2343
  %v4086 = vpop.f32.mrf.mxu0
  %v4087 = vadd.f32 %v3934, %v4086
  %v4088 = vpop.f32.mrf.mxu0
  %v4089 = vadd.f32 %v3936, %v4088
  %v4090 = vpop.f32.mrf.mxu0
  %v4091 = vadd.f32 %v3938, %v4090
  %v4092 = vpop.f32.mrf.mxu0
  %v4093 = vadd.f32 %v3940, %v4092
  %4094 = vmatprep.mubr.bf16.mxu0 0
  %4095 = vmatmul.mubr.bf16.gmra.mxu0 %v2346
  %v4096 = vpop.f32.mrf.mxu0
  %v4097 = vadd.f32 %v3944, %v4096
  %v4098 = vpop.f32.mrf.mxu0
  %v4099 = vadd.f32 %v3946, %v4098
  %v4100 = vpop.f32.mrf.mxu0
  %v4101 = vadd.f32 %v3948, %v4100
  %v4102 = vpop.f32.mrf.mxu0
  %v4103 = vadd.f32 %v3950, %v4102
  %4104 = vmatprep.mubr.bf16.mxu0 0
  %4105 = vmatmul.mubr.bf16.gmra.mxu0 %v2349
  %v4106 = vpop.f32.mrf.mxu0
  %v4107 = vadd.f32 %v3954, %v4106
  %v4108 = vpop.f32.mrf.mxu0
  %v4109 = vadd.f32 %v3956, %v4108
  %v4110 = vpop.f32.mrf.mxu0
  %v4111 = vadd.f32 %v3958, %v4110
  %v4112 = vpop.f32.mrf.mxu0
  %v4113 = vadd.f32 %v3960, %v4112
  %4114 = vdwg.mxu0
  %4115 = vmatprep.subr.bf16.mxu0 %v3638
  %4116 = vmatpush1.bf16.msra.mxu0 %v3637
  %4117 = vmatprep.subr.bf16.mxu0 %v3632
  %4118 = vmatpush1.bf16.msra.mxu0 %v3631
  %4119 = vmatprep.subr.bf16.mxu0 %v3626
  %4120 = vmatpush1.bf16.msra.mxu0 %v3625
  %4121 = vmatprep.subr.bf16.mxu0 %v3620
  %4122 = vmatpush1.bf16.msra.mxu0 %v3619
  %4123 = vmatprep.subr.bf16.mxu0 %v3614
  %4124 = vmatpush1.bf16.msra.mxu0 %v3613
  %4125 = vmatprep.subr.bf16.mxu0 %v3608
  %4126 = vmatpush1.bf16.msra.mxu0 %v3607
  %4127 = vmatprep.subr.bf16.mxu0 %v3602
  %4128 = vmatpush1.bf16.msra.mxu0 %v3601
  %4129 = vmatprep.subr.bf16.mxu0 %v3596
  %4130 = vmatpush1.bf16.msra.mxu0 %v3595
  %4131 = vmatprep.subr.bf16.mxu0 %v3686
  %4132 = vmatpush2.bf16.msra.mxu0 %v3685
  %4133 = vmatprep.subr.bf16.mxu0 %v3680
  %4134 = vmatpush2.bf16.msra.mxu0 %v3679
  %4135 = vmatprep.subr.bf16.mxu0 %v3674
  %4136 = vmatpush2.bf16.msra.mxu0 %v3673
  %4137 = vmatprep.subr.bf16.mxu0 %v3668
  %4138 = vmatpush2.bf16.msra.mxu0 %v3667
  %4139 = vmatprep.subr.bf16.mxu0 %v3662
  %4140 = vmatpush2.bf16.msra.mxu0 %v3661
  %4141 = vmatprep.subr.bf16.mxu0 %v3656
  %4142 = vmatpush2.bf16.msra.mxu0 %v3655
  %4143 = vmatprep.subr.bf16.mxu0 %v3650
  %4144 = vmatpush2.bf16.msra.mxu0 %v3649
  %4145 = vmatprep.subr.bf16.mxu0 %v3644
  %4146 = vmatpush2.bf16.msra.mxu0 %v3643
  %4147 = vmatprep.mubr.bf16.mxu0 %v666
  %4148 = vmatmul.mubr.bf16.gmra.mxu0 %v665
  %v4149 = vpop.f32.mrf.mxu0
  %v4150 = vadd.f32 0.0, %v4149
  %v4151 = vpop.f32.mrf.mxu0
  %v4152 = vadd.f32 0.0, %v4151
  %v4153 = vpop.f32.mrf.mxu0
  %v4154 = vadd.f32 0.0, %v4153
  %v4155 = vpop.f32.mrf.mxu0
  %v4156 = vadd.f32 0.0, %v4155
  %4157 = vmatprep.mubr.bf16.mxu0 %v668
  %4158 = vmatmul.mubr.bf16.gmra.mxu0 %v666
  %v4159 = vpop.f32.mrf.mxu0
  %v4160 = vadd.f32 0.0, %v4159
  %v4161 = vpop.f32.mrf.mxu0
  %v4162 = vadd.f32 0.0, %v4161
  %v4163 = vpop.f32.mrf.mxu0
  %v4164 = vadd.f32 0.0, %v4163
  %v4165 = vpop.f32.mrf.mxu0
  %v4166 = vadd.f32 0.0, %v4165
  %4167 = vmatprep.mubr.bf16.mxu0 %v670
  %4168 = vmatmul.mubr.bf16.gmra.mxu0 %v668
  %v4169 = vpop.f32.mrf.mxu0
  %v4170 = vadd.f32 0.0, %v4169
  %v4171 = vpop.f32.mrf.mxu0
  %v4172 = vadd.f32 0.0, %v4171
  %v4173 = vpop.f32.mrf.mxu0
  %v4174 = vadd.f32 0.0, %v4173
  %v4175 = vpop.f32.mrf.mxu0
  %v4176 = vadd.f32 0.0, %v4175
  %4177 = vmatprep.mubr.bf16.mxu0 %v672
  %4178 = vmatmul.mubr.bf16.gmra.mxu0 %v670
  %v4179 = vpop.f32.mrf.mxu0
  %v4180 = vadd.f32 0.0, %v4179
  %v4181 = vpop.f32.mrf.mxu0
  %v4182 = vadd.f32 0.0, %v4181
  %v4183 = vpop.f32.mrf.mxu0
  %v4184 = vadd.f32 0.0, %v4183
  %v4185 = vpop.f32.mrf.mxu0
  %v4186 = vadd.f32 0.0, %v4185
  %4187 = vmatprep.mubr.bf16.mxu0 %v674
  %4188 = vmatmul.mubr.bf16.gmra.mxu0 %v672
  %v4189 = vpop.f32.mrf.mxu0
  %v4190 = vadd.f32 0.0, %v4189
  %v4191 = vpop.f32.mrf.mxu0
  %v4192 = vadd.f32 0.0, %v4191
  %v4193 = vpop.f32.mrf.mxu0
  %v4194 = vadd.f32 0.0, %v4193
  %v4195 = vpop.f32.mrf.mxu0
  %v4196 = vadd.f32 0.0, %v4195
  %4197 = vmatprep.mubr.bf16.mxu0 %v676
  %4198 = vmatmul.mubr.bf16.gmra.mxu0 %v674
  %v4199 = vpop.f32.mrf.mxu0
  %v4200 = vadd.f32 0.0, %v4199
  %v4201 = vpop.f32.mrf.mxu0
  %v4202 = vadd.f32 0.0, %v4201
  %v4203 = vpop.f32.mrf.mxu0
  %v4204 = vadd.f32 0.0, %v4203
  %v4205 = vpop.f32.mrf.mxu0
  %v4206 = vadd.f32 0.0, %v4205
  %4207 = vmatprep.mubr.bf16.mxu0 %v679
  %4208 = vmatmul.mubr.bf16.gmra.mxu0 %v678
  %v4209 = vpop.f32.mrf.mxu0
  %v4210 = vadd.f32 0.0, %v4209
  %v4211 = vpop.f32.mrf.mxu0
  %v4212 = vadd.f32 0.0, %v4211
  %v4213 = vpop.f32.mrf.mxu0
  %v4214 = vadd.f32 0.0, %v4213
  %v4215 = vpop.f32.mrf.mxu0
  %v4216 = vadd.f32 0.0, %v4215
  %4217 = vmatprep.mubr.bf16.mxu0 %v681
  %4218 = vmatmul.mubr.bf16.gmra.mxu0 %v679
  %v4219 = vpop.f32.mrf.mxu0
  %v4220 = vadd.f32 0.0, %v4219
  %v4221 = vpop.f32.mrf.mxu0
  %v4222 = vadd.f32 0.0, %v4221
  %v4223 = vpop.f32.mrf.mxu0
  %v4224 = vadd.f32 0.0, %v4223
  %v4225 = vpop.f32.mrf.mxu0
  %v4226 = vadd.f32 0.0, %v4225
  %4227 = vmatprep.mubr.bf16.mxu0 %v683
  %4228 = vmatmul.mubr.bf16.gmra.mxu0 %v681
  %v4229 = vpop.f32.mrf.mxu0
  %v4230 = vadd.f32 0.0, %v4229
  %v4231 = vpop.f32.mrf.mxu0
  %v4232 = vadd.f32 0.0, %v4231
  %v4233 = vpop.f32.mrf.mxu0
  %v4234 = vadd.f32 0.0, %v4233
  %v4235 = vpop.f32.mrf.mxu0
  %v4236 = vadd.f32 0.0, %v4235
  %4237 = vmatprep.mubr.bf16.mxu0 %v685
  %4238 = vmatmul.mubr.bf16.gmra.mxu0 %v683
  %v4239 = vpop.f32.mrf.mxu0
  %v4240 = vadd.f32 0.0, %v4239
  %v4241 = vpop.f32.mrf.mxu0
  %v4242 = vadd.f32 0.0, %v4241
  %v4243 = vpop.f32.mrf.mxu0
  %v4244 = vadd.f32 0.0, %v4243
  %v4245 = vpop.f32.mrf.mxu0
  %v4246 = vadd.f32 0.0, %v4245
  %4247 = vmatprep.mubr.bf16.mxu0 %v687
  %4248 = vmatmul.mubr.bf16.gmra.mxu0 %v685
  %v4249 = vpop.f32.mrf.mxu0
  %v4250 = vadd.f32 0.0, %v4249
  %v4251 = vpop.f32.mrf.mxu0
  %v4252 = vadd.f32 0.0, %v4251
  %v4253 = vpop.f32.mrf.mxu0
  %v4254 = vadd.f32 0.0, %v4253
  %v4255 = vpop.f32.mrf.mxu0
  %v4256 = vadd.f32 0.0, %v4255
  %4257 = vmatprep.mubr.bf16.mxu0 %v689
  %4258 = vmatmul.mubr.bf16.gmra.mxu0 %v687
  %v4259 = vpop.f32.mrf.mxu0
  %v4260 = vadd.f32 0.0, %v4259
  %v4261 = vpop.f32.mrf.mxu0
  %v4262 = vadd.f32 0.0, %v4261
  %v4263 = vpop.f32.mrf.mxu0
  %v4264 = vadd.f32 0.0, %v4263
  %v4265 = vpop.f32.mrf.mxu0
  %v4266 = vadd.f32 0.0, %v4265
  %4267 = vdwg.mxu0
  %4268 = vmatprep.subr.bf16.mxu0 0
  %4269 = vmatpush1.bf16.msra.mxu0 0
  %4270 = vmatprep.subr.bf16.mxu0 0
  %4271 = vmatpush1.bf16.msra.mxu0 0
  %4272 = vmatprep.subr.bf16.mxu0 0
  %4273 = vmatpush1.bf16.msra.mxu0 0
  %4274 = vmatprep.subr.bf16.mxu0 0
  %4275 = vmatpush1.bf16.msra.mxu0 0
  %4276 = vmatprep.subr.bf16.mxu0 0
  %4277 = vmatpush1.bf16.msra.mxu0 0
  %4278 = vmatprep.subr.bf16.mxu0 0
  %4279 = vmatpush1.bf16.msra.mxu0 0
  %4280 = vmatprep.subr.bf16.mxu0 %v3698
  %4281 = vmatpush1.bf16.msra.mxu0 %v3697
  %4282 = vmatprep.subr.bf16.mxu0 %v3692
  %4283 = vmatpush1.bf16.msra.mxu0 %v3691
  %4284 = vmatprep.subr.bf16.mxu0 0
  %4285 = vmatpush2.bf16.msra.mxu0 0
  %4286 = vmatprep.subr.bf16.mxu0 0
  %4287 = vmatpush2.bf16.msra.mxu0 0
  %4288 = vmatprep.subr.bf16.mxu0 0
  %4289 = vmatpush2.bf16.msra.mxu0 0
  %4290 = vmatprep.subr.bf16.mxu0 0
  %4291 = vmatpush2.bf16.msra.mxu0 0
  %4292 = vmatprep.subr.bf16.mxu0 0
  %4293 = vmatpush2.bf16.msra.mxu0 0
  %4294 = vmatprep.subr.bf16.mxu0 0
  %4295 = vmatpush2.bf16.msra.mxu0 0
  %4296 = vmatprep.subr.bf16.mxu0 0
  %4297 = vmatpush2.bf16.msra.mxu0 0
  %4298 = vmatprep.subr.bf16.mxu0 0
  %4299 = vmatpush2.bf16.msra.mxu0 0
  %4300 = vmatprep.mubr.bf16.mxu0 0
  %4301 = vmatmul.mubr.bf16.gmra.mxu0 %v2316
  %v4302 = vpop.f32.mrf.mxu0
  %v4303 = vadd.f32 %v4150, %v4302
  %v4304 = vpop.f32.mrf.mxu0
  %v4305 = vadd.f32 %v4152, %v4304
  %v4306 = vpop.f32.mrf.mxu0
  %v4307 = vadd.f32 %v4154, %v4306
  %v4308 = vpop.f32.mrf.mxu0
  %v4309 = vadd.f32 %v4156, %v4308
  %4310 = vmatprep.mubr.bf16.mxu0 0
  %4311 = vmatmul.mubr.bf16.gmra.mxu0 %v2319
  %v4312 = vpop.f32.mrf.mxu0
  %v4313 = vadd.f32 %v4160, %v4312
  %v4314 = vpop.f32.mrf.mxu0
  %v4315 = vadd.f32 %v4162, %v4314
  %v4316 = vpop.f32.mrf.mxu0
  %v4317 = vadd.f32 %v4164, %v4316
  %v4318 = vpop.f32.mrf.mxu0
  %v4319 = vadd.f32 %v4166, %v4318
  %4320 = vmatprep.mubr.bf16.mxu0 0
  %4321 = vmatmul.mubr.bf16.gmra.mxu0 %v2322
  %v4322 = vpop.f32.mrf.mxu0
  %v4323 = vadd.f32 %v4170, %v4322
  %v4324 = vpop.f32.mrf.mxu0
  %v4325 = vadd.f32 %v4172, %v4324
  %v4326 = vpop.f32.mrf.mxu0
  %v4327 = vadd.f32 %v4174, %v4326
  %v4328 = vpop.f32.mrf.mxu0
  %v4329 = vadd.f32 %v4176, %v4328
  %4330 = vmatprep.mubr.bf16.mxu0 0
  %4331 = vmatmul.mubr.bf16.gmra.mxu0 %v2325
  %v4332 = vpop.f32.mrf.mxu0
  %v4333 = vadd.f32 %v4180, %v4332
  %v4334 = vpop.f32.mrf.mxu0
  %v4335 = vadd.f32 %v4182, %v4334
  %v4336 = vpop.f32.mrf.mxu0
  %v4337 = vadd.f32 %v4184, %v4336
  %v4338 = vpop.f32.mrf.mxu0
  %v4339 = vadd.f32 %v4186, %v4338
  %4340 = vmatprep.mubr.bf16.mxu0 0
  %4341 = vmatmul.mubr.bf16.gmra.mxu0 %v2328
  %v4342 = vpop.f32.mrf.mxu0
  %v4343 = vadd.f32 %v4190, %v4342
  %v4344 = vpop.f32.mrf.mxu0
  %v4345 = vadd.f32 %v4192, %v4344
  %v4346 = vpop.f32.mrf.mxu0
  %v4347 = vadd.f32 %v4194, %v4346
  %v4348 = vpop.f32.mrf.mxu0
  %v4349 = vadd.f32 %v4196, %v4348
  %4350 = vmatprep.mubr.bf16.mxu0 0
  %4351 = vmatmul.mubr.bf16.gmra.mxu0 %v2331
  %v4352 = vpop.f32.mrf.mxu0
  %v4353 = vadd.f32 %v4200, %v4352
  %v4354 = vpop.f32.mrf.mxu0
  %v4355 = vadd.f32 %v4202, %v4354
  %v4356 = vpop.f32.mrf.mxu0
  %v4357 = vadd.f32 %v4204, %v4356
  %v4358 = vpop.f32.mrf.mxu0
  %v4359 = vadd.f32 %v4206, %v4358
  %4360 = vmatprep.mubr.bf16.mxu0 0
  %4361 = vmatmul.mubr.bf16.gmra.mxu0 %v2334
  %v4362 = vpop.f32.mrf.mxu0
  %v4363 = vadd.f32 %v4210, %v4362
  %v4364 = vpop.f32.mrf.mxu0
  %v4365 = vadd.f32 %v4212, %v4364
  %v4366 = vpop.f32.mrf.mxu0
  %v4367 = vadd.f32 %v4214, %v4366
  %v4368 = vpop.f32.mrf.mxu0
  %v4369 = vadd.f32 %v4216, %v4368
  %4370 = vmatprep.mubr.bf16.mxu0 0
  %4371 = vmatmul.mubr.bf16.gmra.mxu0 %v2337
  %v4372 = vpop.f32.mrf.mxu0
  %v4373 = vadd.f32 %v4220, %v4372
  %v4374 = vpop.f32.mrf.mxu0
  %v4375 = vadd.f32 %v4222, %v4374
  %v4376 = vpop.f32.mrf.mxu0
  %v4377 = vadd.f32 %v4224, %v4376
  %v4378 = vpop.f32.mrf.mxu0
  %v4379 = vadd.f32 %v4226, %v4378
  %4380 = vmatprep.mubr.bf16.mxu0 0
  %4381 = vmatmul.mubr.bf16.gmra.mxu0 %v2340
  %v4382 = vpop.f32.mrf.mxu0
  %v4383 = vadd.f32 %v4230, %v4382
  %v4384 = vpop.f32.mrf.mxu0
  %v4385 = vadd.f32 %v4232, %v4384
  %v4386 = vpop.f32.mrf.mxu0
  %v4387 = vadd.f32 %v4234, %v4386
  %v4388 = vpop.f32.mrf.mxu0
  %v4389 = vadd.f32 %v4236, %v4388
  %4390 = vmatprep.mubr.bf16.mxu0 0
  %4391 = vmatmul.mubr.bf16.gmra.mxu0 %v2343
  %v4392 = vpop.f32.mrf.mxu0
  %v4393 = vadd.f32 %v4240, %v4392
  %v4394 = vpop.f32.mrf.mxu0
  %v4395 = vadd.f32 %v4242, %v4394
  %v4396 = vpop.f32.mrf.mxu0
  %v4397 = vadd.f32 %v4244, %v4396
  %v4398 = vpop.f32.mrf.mxu0
  %v4399 = vadd.f32 %v4246, %v4398
  %4400 = vmatprep.mubr.bf16.mxu0 0
  %4401 = vmatmul.mubr.bf16.gmra.mxu0 %v2346
  %v4402 = vpop.f32.mrf.mxu0
  %v4403 = vadd.f32 %v4250, %v4402
  %v4404 = vpop.f32.mrf.mxu0
  %v4405 = vadd.f32 %v4252, %v4404
  %v4406 = vpop.f32.mrf.mxu0
  %v4407 = vadd.f32 %v4254, %v4406
  %v4408 = vpop.f32.mrf.mxu0
  %v4409 = vadd.f32 %v4256, %v4408
  %4410 = vmatprep.mubr.bf16.mxu0 0
  %4411 = vmatmul.mubr.bf16.gmra.mxu0 %v2349
  %v4412 = vpop.f32.mrf.mxu0
  %v4413 = vadd.f32 %v4260, %v4412
  %v4414 = vpop.f32.mrf.mxu0
  %v4415 = vadd.f32 %v4262, %v4414
  %v4416 = vpop.f32.mrf.mxu0
  %v4417 = vadd.f32 %v4264, %v4416
  %v4418 = vpop.f32.mrf.mxu0
  %v4419 = vadd.f32 %v4266, %v4418
  %4420 = vdwg.mxu0
  %4421 = vmatprep.subr.bf16.mxu0 %v3640
  %4422 = vmatpush1.bf16.msra.mxu0 %v3639
  %4423 = vmatprep.subr.bf16.mxu0 %v3634
  %4424 = vmatpush1.bf16.msra.mxu0 %v3633
  %4425 = vmatprep.subr.bf16.mxu0 %v3628
  %4426 = vmatpush1.bf16.msra.mxu0 %v3627
  %4427 = vmatprep.subr.bf16.mxu0 %v3622
  %4428 = vmatpush1.bf16.msra.mxu0 %v3621
  %4429 = vmatprep.subr.bf16.mxu0 %v3616
  %4430 = vmatpush1.bf16.msra.mxu0 %v3615
  %4431 = vmatprep.subr.bf16.mxu0 %v3610
  %4432 = vmatpush1.bf16.msra.mxu0 %v3609
  %4433 = vmatprep.subr.bf16.mxu0 %v3604
  %4434 = vmatpush1.bf16.msra.mxu0 %v3603
  %4435 = vmatprep.subr.bf16.mxu0 %v3598
  %4436 = vmatpush1.bf16.msra.mxu0 %v3597
  %4437 = vmatprep.subr.bf16.mxu0 %v3688
  %4438 = vmatpush2.bf16.msra.mxu0 %v3687
  %4439 = vmatprep.subr.bf16.mxu0 %v3682
  %4440 = vmatpush2.bf16.msra.mxu0 %v3681
  %4441 = vmatprep.subr.bf16.mxu0 %v3676
  %4442 = vmatpush2.bf16.msra.mxu0 %v3675
  %4443 = vmatprep.subr.bf16.mxu0 %v3670
  %4444 = vmatpush2.bf16.msra.mxu0 %v3669
  %4445 = vmatprep.subr.bf16.mxu0 %v3664
  %4446 = vmatpush2.bf16.msra.mxu0 %v3663
  %4447 = vmatprep.subr.bf16.mxu0 %v3658
  %4448 = vmatpush2.bf16.msra.mxu0 %v3657
  %4449 = vmatprep.subr.bf16.mxu0 %v3652
  %4450 = vmatpush2.bf16.msra.mxu0 %v3651
  %4451 = vmatprep.subr.bf16.mxu0 %v3646
  %4452 = vmatpush2.bf16.msra.mxu0 %v3645
  %4453 = vmatprep.mubr.bf16.mxu0 %v666
  %4454 = vmatmul.mubr.bf16.gmra.mxu0 %v665
  %v4455 = vpop.f32.mrf.mxu0
  %v4456 = vadd.f32 0.0, %v4455
  %v4457 = vpop.f32.mrf.mxu0
  %v4458 = vadd.f32 0.0, %v4457
  %v4459 = vpop.f32.mrf.mxu0
  %v4460 = vadd.f32 0.0, %v4459
  %v4461 = vpop.f32.mrf.mxu0
  %v4462 = vadd.f32 0.0, %v4461
  %4463 = vmatprep.mubr.bf16.mxu0 %v668
  %4464 = vmatmul.mubr.bf16.gmra.mxu0 %v666
  %v4465 = vpop.f32.mrf.mxu0
  %v4466 = vadd.f32 0.0, %v4465
  %v4467 = vpop.f32.mrf.mxu0
  %v4468 = vadd.f32 0.0, %v4467
  %v4469 = vpop.f32.mrf.mxu0
  %v4470 = vadd.f32 0.0, %v4469
  %v4471 = vpop.f32.mrf.mxu0
  %v4472 = vadd.f32 0.0, %v4471
  %4473 = vmatprep.mubr.bf16.mxu0 %v670
  %4474 = vmatmul.mubr.bf16.gmra.mxu0 %v668
  %v4475 = vpop.f32.mrf.mxu0
  %v4476 = vadd.f32 0.0, %v4475
  %v4477 = vpop.f32.mrf.mxu0
  %v4478 = vadd.f32 0.0, %v4477
  %v4479 = vpop.f32.mrf.mxu0
  %v4480 = vadd.f32 0.0, %v4479
  %v4481 = vpop.f32.mrf.mxu0
  %v4482 = vadd.f32 0.0, %v4481
  %4483 = vmatprep.mubr.bf16.mxu0 %v672
  %4484 = vmatmul.mubr.bf16.gmra.mxu0 %v670
  %v4485 = vpop.f32.mrf.mxu0
  %v4486 = vadd.f32 0.0, %v4485
  %v4487 = vpop.f32.mrf.mxu0
  %v4488 = vadd.f32 0.0, %v4487
  %v4489 = vpop.f32.mrf.mxu0
  %v4490 = vadd.f32 0.0, %v4489
  %v4491 = vpop.f32.mrf.mxu0
  %v4492 = vadd.f32 0.0, %v4491
  %4493 = vmatprep.mubr.bf16.mxu0 %v674
  %4494 = vmatmul.mubr.bf16.gmra.mxu0 %v672
  %v4495 = vpop.f32.mrf.mxu0
  %v4496 = vadd.f32 0.0, %v4495
  %v4497 = vpop.f32.mrf.mxu0
  %v4498 = vadd.f32 0.0, %v4497
  %v4499 = vpop.f32.mrf.mxu0
  %v4500 = vadd.f32 0.0, %v4499
  %v4501 = vpop.f32.mrf.mxu0
  %v4502 = vadd.f32 0.0, %v4501
  %4503 = vmatprep.mubr.bf16.mxu0 %v676
  %4504 = vmatmul.mubr.bf16.gmra.mxu0 %v674
  %v4505 = vpop.f32.mrf.mxu0
  %v4506 = vadd.f32 0.0, %v4505
  %v4507 = vpop.f32.mrf.mxu0
  %v4508 = vadd.f32 0.0, %v4507
  %v4509 = vpop.f32.mrf.mxu0
  %v4510 = vadd.f32 0.0, %v4509
  %v4511 = vpop.f32.mrf.mxu0
  %v4512 = vadd.f32 0.0, %v4511
  %4513 = vmatprep.mubr.bf16.mxu0 %v679
  %4514 = vmatmul.mubr.bf16.gmra.mxu0 %v678
  %v4515 = vpop.f32.mrf.mxu0
  %v4516 = vadd.f32 0.0, %v4515
  %v4517 = vpop.f32.mrf.mxu0
  %v4518 = vadd.f32 0.0, %v4517
  %v4519 = vpop.f32.mrf.mxu0
  %v4520 = vadd.f32 0.0, %v4519
  %v4521 = vpop.f32.mrf.mxu0
  %v4522 = vadd.f32 0.0, %v4521
  %4523 = vmatprep.mubr.bf16.mxu0 %v681
  %4524 = vmatmul.mubr.bf16.gmra.mxu0 %v679
  %v4525 = vpop.f32.mrf.mxu0
  %v4526 = vadd.f32 0.0, %v4525
  %v4527 = vpop.f32.mrf.mxu0
  %v4528 = vadd.f32 0.0, %v4527
  %v4529 = vpop.f32.mrf.mxu0
  %v4530 = vadd.f32 0.0, %v4529
  %v4531 = vpop.f32.mrf.mxu0
  %v4532 = vadd.f32 0.0, %v4531
  %4533 = vmatprep.mubr.bf16.mxu0 %v683
  %4534 = vmatmul.mubr.bf16.gmra.mxu0 %v681
  %v4535 = vpop.f32.mrf.mxu0
  %v4536 = vadd.f32 0.0, %v4535
  %v4537 = vpop.f32.mrf.mxu0
  %v4538 = vadd.f32 0.0, %v4537
  %v4539 = vpop.f32.mrf.mxu0
  %v4540 = vadd.f32 0.0, %v4539
  %v4541 = vpop.f32.mrf.mxu0
  %v4542 = vadd.f32 0.0, %v4541
  %4543 = vmatprep.mubr.bf16.mxu0 %v685
  %4544 = vmatmul.mubr.bf16.gmra.mxu0 %v683
  %v4545 = vpop.f32.mrf.mxu0
  %v4546 = vadd.f32 0.0, %v4545
  %v4547 = vpop.f32.mrf.mxu0
  %v4548 = vadd.f32 0.0, %v4547
  %v4549 = vpop.f32.mrf.mxu0
  %v4550 = vadd.f32 0.0, %v4549
  %v4551 = vpop.f32.mrf.mxu0
  %v4552 = vadd.f32 0.0, %v4551
  %4553 = vmatprep.mubr.bf16.mxu0 %v687
  %4554 = vmatmul.mubr.bf16.gmra.mxu0 %v685
  %v4555 = vpop.f32.mrf.mxu0
  %v4556 = vadd.f32 0.0, %v4555
  %v4557 = vpop.f32.mrf.mxu0
  %v4558 = vadd.f32 0.0, %v4557
  %v4559 = vpop.f32.mrf.mxu0
  %v4560 = vadd.f32 0.0, %v4559
  %v4561 = vpop.f32.mrf.mxu0
  %v4562 = vadd.f32 0.0, %v4561
  %4563 = vmatprep.mubr.bf16.mxu0 %v689
  %4564 = vmatmul.mubr.bf16.gmra.mxu0 %v687
  %v4565 = vpop.f32.mrf.mxu0
  %v4566 = vadd.f32 0.0, %v4565
  %v4567 = vpop.f32.mrf.mxu0
  %v4568 = vadd.f32 0.0, %v4567
  %v4569 = vpop.f32.mrf.mxu0
  %v4570 = vadd.f32 0.0, %v4569
  %v4571 = vpop.f32.mrf.mxu0
  %v4572 = vadd.f32 0.0, %v4571
  %4573 = vdwg.mxu0
  %4574 = vmatprep.subr.bf16.mxu0 0
  %4575 = vmatpush1.bf16.msra.mxu0 0
  %4576 = vmatprep.subr.bf16.mxu0 0
  %4577 = vmatpush1.bf16.msra.mxu0 0
  %4578 = vmatprep.subr.bf16.mxu0 0
  %4579 = vmatpush1.bf16.msra.mxu0 0
  %4580 = vmatprep.subr.bf16.mxu0 0
  %4581 = vmatpush1.bf16.msra.mxu0 0
  %4582 = vmatprep.subr.bf16.mxu0 0
  %4583 = vmatpush1.bf16.msra.mxu0 0
  %4584 = vmatprep.subr.bf16.mxu0 0
  %4585 = vmatpush1.bf16.msra.mxu0 0
  %4586 = vmatprep.subr.bf16.mxu0 %v3700
  %4587 = vmatpush1.bf16.msra.mxu0 %v3699
  %4588 = vmatprep.subr.bf16.mxu0 %v3694
  %4589 = vmatpush1.bf16.msra.mxu0 %v3693
  %4590 = vmatprep.subr.bf16.mxu0 0
  %4591 = vmatpush2.bf16.msra.mxu0 0
  %4592 = vmatprep.subr.bf16.mxu0 0
  %4593 = vmatpush2.bf16.msra.mxu0 0
  %4594 = vmatprep.subr.bf16.mxu0 0
  %4595 = vmatpush2.bf16.msra.mxu0 0
  %4596 = vmatprep.subr.bf16.mxu0 0
  %4597 = vmatpush2.bf16.msra.mxu0 0
  %4598 = vmatprep.subr.bf16.mxu0 0
  %4599 = vmatpush2.bf16.msra.mxu0 0
  %4600 = vmatprep.subr.bf16.mxu0 0
  %4601 = vmatpush2.bf16.msra.mxu0 0
  %4602 = vmatprep.subr.bf16.mxu0 0
  %4603 = vmatpush2.bf16.msra.mxu0 0
  %4604 = vmatprep.subr.bf16.mxu0 0
  %4605 = vmatpush2.bf16.msra.mxu0 0
  %4606 = vmatprep.mubr.bf16.mxu0 0
  %4607 = vmatmul.mubr.bf16.gmra.mxu0 %v2316
  %v4608 = vpop.f32.mrf.mxu0
  %v4609 = vadd.f32 %v4456, %v4608
  %v4610 = vpop.f32.mrf.mxu0
  %v4611 = vadd.f32 %v4458, %v4610
  %v4612 = vpop.f32.mrf.mxu0
  %v4613 = vadd.f32 %v4460, %v4612
  %v4614 = vpop.f32.mrf.mxu0
  %v4615 = vadd.f32 %v4462, %v4614
  %4616 = vmatprep.mubr.bf16.mxu0 0
  %4617 = vmatmul.mubr.bf16.gmra.mxu0 %v2319
  %v4618 = vpop.f32.mrf.mxu0
  %v4619 = vadd.f32 %v4466, %v4618
  %v4620 = vpop.f32.mrf.mxu0
  %v4621 = vadd.f32 %v4468, %v4620
  %v4622 = vpop.f32.mrf.mxu0
  %v4623 = vadd.f32 %v4470, %v4622
  %v4624 = vpop.f32.mrf.mxu0
  %v4625 = vadd.f32 %v4472, %v4624
  %4626 = vmatprep.mubr.bf16.mxu0 0
  %4627 = vmatmul.mubr.bf16.gmra.mxu0 %v2322
  %v4628 = vpop.f32.mrf.mxu0
  %v4629 = vadd.f32 %v4476, %v4628
  %v4630 = vpop.f32.mrf.mxu0
  %v4631 = vadd.f32 %v4478, %v4630
  %v4632 = vpop.f32.mrf.mxu0
  %v4633 = vadd.f32 %v4480, %v4632
  %v4634 = vpop.f32.mrf.mxu0
  %v4635 = vadd.f32 %v4482, %v4634
  %4636 = vmatprep.mubr.bf16.mxu0 0
  %4637 = vmatmul.mubr.bf16.gmra.mxu0 %v2325
  %v4638 = vpop.f32.mrf.mxu0
  %v4639 = vadd.f32 %v4486, %v4638
  %v4640 = vpop.f32.mrf.mxu0
  %v4641 = vadd.f32 %v4488, %v4640
  %v4642 = vpop.f32.mrf.mxu0
  %v4643 = vadd.f32 %v4490, %v4642
  %v4644 = vpop.f32.mrf.mxu0
  %v4645 = vadd.f32 %v4492, %v4644
  %4646 = vmatprep.mubr.bf16.mxu0 0
  %4647 = vmatmul.mubr.bf16.gmra.mxu0 %v2328
  %v4648 = vpop.f32.mrf.mxu0
  %v4649 = vadd.f32 %v4496, %v4648
  %v4650 = vpop.f32.mrf.mxu0
  %v4651 = vadd.f32 %v4498, %v4650
  %v4652 = vpop.f32.mrf.mxu0
  %v4653 = vadd.f32 %v4500, %v4652
  %v4654 = vpop.f32.mrf.mxu0
  %v4655 = vadd.f32 %v4502, %v4654
  %4656 = vmatprep.mubr.bf16.mxu0 0
  %4657 = vmatmul.mubr.bf16.gmra.mxu0 %v2331
  %v4658 = vpop.f32.mrf.mxu0
  %v4659 = vadd.f32 %v4506, %v4658
  %v4660 = vpop.f32.mrf.mxu0
  %v4661 = vadd.f32 %v4508, %v4660
  %v4662 = vpop.f32.mrf.mxu0
  %v4663 = vadd.f32 %v4510, %v4662
  %v4664 = vpop.f32.mrf.mxu0
  %v4665 = vadd.f32 %v4512, %v4664
  %4666 = vmatprep.mubr.bf16.mxu0 0
  %4667 = vmatmul.mubr.bf16.gmra.mxu0 %v2334
  %v4668 = vpop.f32.mrf.mxu0
  %v4669 = vadd.f32 %v4516, %v4668
  %v4670 = vpop.f32.mrf.mxu0
  %v4671 = vadd.f32 %v4518, %v4670
  %v4672 = vpop.f32.mrf.mxu0
  %v4673 = vadd.f32 %v4520, %v4672
  %v4674 = vpop.f32.mrf.mxu0
  %v4675 = vadd.f32 %v4522, %v4674
  %4676 = vmatprep.mubr.bf16.mxu0 0
  %4677 = vmatmul.mubr.bf16.gmra.mxu0 %v2337
  %v4678 = vpop.f32.mrf.mxu0
  %v4679 = vadd.f32 %v4526, %v4678
  %v4680 = vpop.f32.mrf.mxu0
  %v4681 = vadd.f32 %v4528, %v4680
  %v4682 = vpop.f32.mrf.mxu0
  %v4683 = vadd.f32 %v4530, %v4682
  %v4684 = vpop.f32.mrf.mxu0
  %v4685 = vadd.f32 %v4532, %v4684
  %4686 = vmatprep.mubr.bf16.mxu0 0
  %4687 = vmatmul.mubr.bf16.gmra.mxu0 %v2340
  %v4688 = vpop.f32.mrf.mxu0
  %v4689 = vadd.f32 %v4536, %v4688
  %v4690 = vpop.f32.mrf.mxu0
  %v4691 = vadd.f32 %v4538, %v4690
  %v4692 = vpop.f32.mrf.mxu0
  %v4693 = vadd.f32 %v4540, %v4692
  %v4694 = vpop.f32.mrf.mxu0
  %v4695 = vadd.f32 %v4542, %v4694
  %4696 = vmatprep.mubr.bf16.mxu0 0
  %4697 = vmatmul.mubr.bf16.gmra.mxu0 %v2343
  %v4698 = vpop.f32.mrf.mxu0
  %v4699 = vadd.f32 %v4546, %v4698
  %v4700 = vpop.f32.mrf.mxu0
  %v4701 = vadd.f32 %v4548, %v4700
  %v4702 = vpop.f32.mrf.mxu0
  %v4703 = vadd.f32 %v4550, %v4702
  %v4704 = vpop.f32.mrf.mxu0
  %v4705 = vadd.f32 %v4552, %v4704
  %4706 = vmatprep.mubr.bf16.mxu0 0
  %4707 = vmatmul.mubr.bf16.gmra.mxu0 %v2346
  %v4708 = vpop.f32.mrf.mxu0
  %v4709 = vadd.f32 %v4556, %v4708
  %v4710 = vpop.f32.mrf.mxu0
  %v4711 = vadd.f32 %v4558, %v4710
  %v4712 = vpop.f32.mrf.mxu0
  %v4713 = vadd.f32 %v4560, %v4712
  %v4714 = vpop.f32.mrf.mxu0
  %v4715 = vadd.f32 %v4562, %v4714
  %4716 = vmatprep.mubr.bf16.mxu0 0
  %4717 = vmatmul.mubr.bf16.gmra.mxu0 %v2349
  %v4718 = vpop.f32.mrf.mxu0
  %v4719 = vadd.f32 %v4566, %v4718
  %v4720 = vpop.f32.mrf.mxu0
  %v4721 = vadd.f32 %v4568, %v4720
  %v4722 = vpop.f32.mrf.mxu0
  %v4723 = vadd.f32 %v4570, %v4722
  %v4724 = vpop.f32.mrf.mxu0
  %v4725 = vadd.f32 %v4572, %v4724
  %4726 = vdwg.mxu0
  %v4727 = vadd.f32 %v2539, %v3997
  %v4728 = vadd.f32 %v2541, %v3999
  %v4729 = vadd.f32 %v2845, %v4303
  %v4730 = vadd.f32 %v2847, %v4305
  %v4731 = vadd.f32 %v3151, %v4609
  %v4732 = vadd.f32 %v3153, %v4611
  %v4733 = vadd.f32 %v2543, %v4001
  %v4734 = vadd.f32 %v2545, %v4003
  %v4735 = vadd.f32 %v2849, %v4307
  %v4736 = vadd.f32 %v2851, %v4309
  %v4737 = vadd.f32 %v3155, %v4613
  %v4738 = vadd.f32 %v3157, %v4615
  %v4739 = vadd.f32 %v2549, %v4007
  %v4740 = vadd.f32 %v2551, %v4009
  %v4741 = vadd.f32 %v2855, %v4313
  %v4742 = vadd.f32 %v2857, %v4315
  %v4743 = vadd.f32 %v3161, %v4619
  %v4744 = vadd.f32 %v3163, %v4621
  %v4745 = vadd.f32 %v2553, %v4011
  %v4746 = vadd.f32 %v2555, %v4013
  %v4747 = vadd.f32 %v2859, %v4317
  %v4748 = vadd.f32 %v2861, %v4319
  %v4749 = vadd.f32 %v3165, %v4623
  %v4750 = vadd.f32 %v3167, %v4625
  %v4751 = vadd.f32 %v2559, %v4017
  %v4752 = vadd.f32 %v2561, %v4019
  %v4753 = vadd.f32 %v2865, %v4323
  %v4754 = vadd.f32 %v2867, %v4325
  %v4755 = vadd.f32 %v3171, %v4629
  %v4756 = vadd.f32 %v3173, %v4631
  %v4757 = vadd.f32 %v2563, %v4021
  %v4758 = vadd.f32 %v2565, %v4023
  %v4759 = vadd.f32 %v2869, %v4327
  %v4760 = vadd.f32 %v2871, %v4329
  %v4761 = vadd.f32 %v3175, %v4633
  %v4762 = vadd.f32 %v3177, %v4635
  %v4763 = vadd.f32 %v2569, %v4027
  %v4764 = vadd.f32 %v2571, %v4029
  %v4765 = vadd.f32 %v2875, %v4333
  %v4766 = vadd.f32 %v2877, %v4335
  %v4767 = vadd.f32 %v3181, %v4639
  %v4768 = vadd.f32 %v3183, %v4641
  %v4769 = vadd.f32 %v2573, %v4031
  %v4770 = vadd.f32 %v2575, %v4033
  %v4771 = vadd.f32 %v2879, %v4337
  %v4772 = vadd.f32 %v2881, %v4339
  %v4773 = vadd.f32 %v3185, %v4643
  %v4774 = vadd.f32 %v3187, %v4645
  %v4775 = vadd.f32 %v2579, %v4037
  %v4776 = vadd.f32 %v2581, %v4039
  %v4777 = vadd.f32 %v2885, %v4343
  %v4778 = vadd.f32 %v2887, %v4345
  %v4779 = vadd.f32 %v3191, %v4649
  %v4780 = vadd.f32 %v3193, %v4651
  %v4781 = vadd.f32 %v2583, %v4041
  %v4782 = vadd.f32 %v2585, %v4043
  %v4783 = vadd.f32 %v2889, %v4347
  %v4784 = vadd.f32 %v2891, %v4349
  %v4785 = vadd.f32 %v3195, %v4653
  %v4786 = vadd.f32 %v3197, %v4655
  %v4787 = vadd.f32 %v2589, %v4047
  %v4788 = vadd.f32 %v2591, %v4049
  %v4789 = vadd.f32 %v2895, %v4353
  %v4790 = vadd.f32 %v2897, %v4355
  %v4791 = vadd.f32 %v3201, %v4659
  %v4792 = vadd.f32 %v3203, %v4661
  %v4793 = vadd.f32 %v2593, %v4051
  %v4794 = vadd.f32 %v2595, %v4053
  %v4795 = vadd.f32 %v2899, %v4357
  %v4796 = vadd.f32 %v2901, %v4359
  %v4797 = vadd.f32 %v3205, %v4663
  %v4798 = vadd.f32 %v3207, %v4665
  %v4799 = vadd.f32 %v2599, %v4057
  %v4800 = vadd.f32 %v2601, %v4059
  %v4801 = vadd.f32 %v2905, %v4363
  %v4802 = vadd.f32 %v2907, %v4365
  %v4803 = vadd.f32 %v3211, %v4669
  %v4804 = vadd.f32 %v3213, %v4671
  %v4805 = vadd.f32 %v2603, %v4061
  %v4806 = vadd.f32 %v2605, %v4063
  %v4807 = vadd.f32 %v2909, %v4367
  %v4808 = vadd.f32 %v2911, %v4369
  %v4809 = vadd.f32 %v3215, %v4673
  %v4810 = vadd.f32 %v3217, %v4675
  %v4811 = vadd.f32 %v2609, %v4067
  %v4812 = vadd.f32 %v2611, %v4069
  %v4813 = vadd.f32 %v2915, %v4373
  %v4814 = vadd.f32 %v2917, %v4375
  %v4815 = vadd.f32 %v3221, %v4679
  %v4816 = vadd.f32 %v3223, %v4681
  %v4817 = vadd.f32 %v2613, %v4071
  %v4818 = vadd.f32 %v2615, %v4073
  %v4819 = vadd.f32 %v2919, %v4377
  %v4820 = vadd.f32 %v2921, %v4379
  %v4821 = vadd.f32 %v3225, %v4683
  %v4822 = vadd.f32 %v3227, %v4685
  %v4823 = vadd.f32 %v2619, %v4077
  %v4824 = vadd.f32 %v2621, %v4079
  %v4825 = vadd.f32 %v2925, %v4383
  %v4826 = vadd.f32 %v2927, %v4385
  %v4827 = vadd.f32 %v3231, %v4689
  %v4828 = vadd.f32 %v3233, %v4691
  %v4829 = vadd.f32 %v2623, %v4081
  %v4830 = vadd.f32 %v2625, %v4083
  %v4831 = vadd.f32 %v2929, %v4387
  %v4832 = vadd.f32 %v2931, %v4389
  %v4833 = vadd.f32 %v3235, %v4693
  %v4834 = vadd.f32 %v3237, %v4695
  %v4835 = vadd.f32 %v2629, %v4087
  %v4836 = vadd.f32 %v2631, %v4089
  %v4837 = vadd.f32 %v2935, %v4393
  %v4838 = vadd.f32 %v2937, %v4395
  %v4839 = vadd.f32 %v3241, %v4699
  %v4840 = vadd.f32 %v3243, %v4701
  %v4841 = vadd.f32 %v2633, %v4091
  %v4842 = vadd.f32 %v2635, %v4093
  %v4843 = vadd.f32 %v2939, %v4397
  %v4844 = vadd.f32 %v2941, %v4399
  %v4845 = vadd.f32 %v3245, %v4703
  %v4846 = vadd.f32 %v3247, %v4705
  %v4847 = vadd.f32 %v2639, %v4097
  %v4848 = vadd.f32 %v2641, %v4099
  %v4849 = vadd.f32 %v2945, %v4403
  %v4850 = vadd.f32 %v2947, %v4405
  %v4851 = vadd.f32 %v3251, %v4709
  %v4852 = vadd.f32 %v3253, %v4711
  %v4853 = vadd.f32 %v2643, %v4101
  %v4854 = vadd.f32 %v2645, %v4103
  %v4855 = vadd.f32 %v2949, %v4407
  %v4856 = vadd.f32 %v2951, %v4409
  %v4857 = vadd.f32 %v3255, %v4713
  %v4858 = vadd.f32 %v3257, %v4715
  %v4859 = vadd.f32 %v2649, %v4107
  %v4860 = vadd.f32 %v2651, %v4109
  %v4861 = vadd.f32 %v2955, %v4413
  %v4862 = vadd.f32 %v2957, %v4415
  %v4863 = vadd.f32 %v3261, %v4719
  %v4864 = vadd.f32 %v3263, %v4721
  %v4865 = vadd.f32 %v2653, %v4111
  %v4866 = vadd.f32 %v2655, %v4113
  %v4867 = vadd.f32 %v2959, %v4417
  %v4868 = vadd.f32 %v2961, %v4419
  %v4869 = vadd.f32 %v3265, %v4723
  %v4870 = vadd.f32 %v3267, %v4725
  %v4871 = vmax.f32 %v4727, %v4799
  %v4872 = vmax.f32 %v4728, %v4800
  %v4873 = vmax.f32 %v4729, %v4801
  %v4874 = vmax.f32 %v4730, %v4802
  %v4875 = vmax.f32 %v4731, %v4803
  %v4876 = vmax.f32 %v4732, %v4804
  %v4877 = vmax.f32 %v4733, %v4805
  %v4878 = vmax.f32 %v4734, %v4806
  %v4879 = vmax.f32 %v4735, %v4807
  %v4880 = vmax.f32 %v4736, %v4808
  %v4881 = vmax.f32 %v4737, %v4809
  %v4882 = vmax.f32 %v4738, %v4810
  %v4883 = vmax.f32 %v4739, %v4811
  %v4884 = vmax.f32 %v4740, %v4812
  %v4885 = vmax.f32 %v4741, %v4813
  %v4886 = vmax.f32 %v4742, %v4814
  %v4887 = vmax.f32 %v4743, %v4815
  %v4888 = vmax.f32 %v4744, %v4816
  %v4889 = vmax.f32 %v4745, %v4817
  %v4890 = vmax.f32 %v4746, %v4818
  %v4891 = vmax.f32 %v4747, %v4819
  %v4892 = vmax.f32 %v4748, %v4820
  %v4893 = vmax.f32 %v4749, %v4821
  %v4894 = vmax.f32 %v4750, %v4822
  %v4895 = vmax.f32 %v4751, %v4823
  %v4896 = vmax.f32 %v4752, %v4824
  %v4897 = vmax.f32 %v4753, %v4825
  %v4898 = vmax.f32 %v4754, %v4826
  %v4899 = vmax.f32 %v4755, %v4827
  %v4900 = vmax.f32 %v4756, %v4828
  %v4901 = vmax.f32 %v4757, %v4829
  %v4902 = vmax.f32 %v4758, %v4830
  %v4903 = vmax.f32 %v4759, %v4831
  %v4904 = vmax.f32 %v4760, %v4832
  %v4905 = vmax.f32 %v4761, %v4833
  %v4906 = vmax.f32 %v4762, %v4834
  %v4907 = vmax.f32 %v4763, %v4835
  %v4908 = vmax.f32 %v4764, %v4836
  %v4909 = vmax.f32 %v4765, %v4837
  %v4910 = vmax.f32 %v4766, %v4838
  %v4911 = vmax.f32 %v4767, %v4839
  %v4912 = vmax.f32 %v4768, %v4840
  %v4913 = vmax.f32 %v4769, %v4841
  %v4914 = vmax.f32 %v4770, %v4842
  %v4915 = vmax.f32 %v4771, %v4843
  %v4916 = vmax.f32 %v4772, %v4844
  %v4917 = vmax.f32 %v4773, %v4845
  %v4918 = vmax.f32 %v4774, %v4846
  %v4919 = vmax.f32 %v4775, %v4847
  %v4920 = vmax.f32 %v4776, %v4848
  %v4921 = vmax.f32 %v4777, %v4849
  %v4922 = vmax.f32 %v4778, %v4850
  %v4923 = vmax.f32 %v4779, %v4851
  %v4924 = vmax.f32 %v4780, %v4852
  %v4925 = vmax.f32 %v4781, %v4853
  %v4926 = vmax.f32 %v4782, %v4854
  %v4927 = vmax.f32 %v4783, %v4855
  %v4928 = vmax.f32 %v4784, %v4856
  %v4929 = vmax.f32 %v4785, %v4857
  %v4930 = vmax.f32 %v4786, %v4858
  %v4931 = vmax.f32 %v4787, %v4859
  %v4932 = vmax.f32 %v4788, %v4860
  %v4933 = vmax.f32 %v4789, %v4861
  %v4934 = vmax.f32 %v4790, %v4862
  %v4935 = vmax.f32 %v4791, %v4863
  %v4936 = vmax.f32 %v4792, %v4864
  %v4937 = vmax.f32 %v4793, %v4865
  %v4938 = vmax.f32 %v4794, %v4866
  %v4939 = vmax.f32 %v4795, %v4867
  %v4940 = vmax.f32 %v4796, %v4868
  %v4941 = vmax.f32 %v4797, %v4869
  %v4942 = vmax.f32 %v4798, %v4870
  %v4943 = vld [vmem:[%s4] sm:$0x3f]
  %v4945 = vlaneseq
  %v4946 = vshrl.u32 %v4945, 7
  %v4947 = vsub.s32 0, %v4946
  %v4948 = vrot.slane %v4943, %v4947
  %v4949 = vlaneseq
  %v4950 = vshrl.u32 %v4949, 7
  %v4951 = vsub.s32 1, %v4950
  %v4952 = vrot.slane %v4943, %v4951
  %v4953 = vlaneseq
  %v4954 = vshrl.u32 %v4953, 7
  %v4955 = vsub.s32 2, %v4954
  %v4956 = vrot.slane %v4943, %v4955
  %v4957 = vlaneseq
  %v4958 = vshrl.u32 %v4957, 7
  %v4959 = vsub.s32 3, %v4958
  %v4960 = vrot.slane %v4943, %v4959
  %v4961 = vlaneseq
  %v4962 = vshrl.u32 %v4961, 7
  %v4963 = vsub.s32 4, %v4962
  %v4964 = vrot.slane %v4943, %v4963
  %v4965 = vlaneseq
  %v4966 = vshrl.u32 %v4965, 7
  %v4967 = vsub.s32 5, %v4966
  %v4968 = vrot.slane %v4943, %v4967
  %v4975 = vadd.f32 %v4871, %v4948
  %v4976 = vadd.f32 %v4872, %v4952
  %v4977 = vadd.f32 %v4873, %v4956
  %v4978 = vadd.f32 %v4874, %v4960
  %v4979 = vadd.f32 %v4875, %v4964
  %v4980 = vadd.f32 %v4876, %v4968
  %v4981 = vadd.f32 %v4877, %v4948
  %v4982 = vadd.f32 %v4878, %v4952
  %v4983 = vadd.f32 %v4879, %v4956
  %v4984 = vadd.f32 %v4880, %v4960
  %v4985 = vadd.f32 %v4881, %v4964
  %v4986 = vadd.f32 %v4882, %v4968
  %v4987 = vadd.f32 %v4883, %v4948
  %v4988 = vadd.f32 %v4884, %v4952
  %v4989 = vadd.f32 %v4885, %v4956
  %v4990 = vadd.f32 %v4886, %v4960
  %v4991 = vadd.f32 %v4887, %v4964
  %v4992 = vadd.f32 %v4888, %v4968
  %v4993 = vadd.f32 %v4889, %v4948
  %v4994 = vadd.f32 %v4890, %v4952
  %v4995 = vadd.f32 %v4891, %v4956
  %v4996 = vadd.f32 %v4892, %v4960
  %v4997 = vadd.f32 %v4893, %v4964
  %v4998 = vadd.f32 %v4894, %v4968
  %v4999 = vadd.f32 %v4895, %v4948
  %v5000 = vadd.f32 %v4896, %v4952
  %v5001 = vadd.f32 %v4897, %v4956
  %v5002 = vadd.f32 %v4898, %v4960
  %v5003 = vadd.f32 %v4899, %v4964
  %v5004 = vadd.f32 %v4900, %v4968
  %v5005 = vadd.f32 %v4901, %v4948
  %v5006 = vadd.f32 %v4902, %v4952
  %v5007 = vadd.f32 %v4903, %v4956
  %v5008 = vadd.f32 %v4904, %v4960
  %v5009 = vadd.f32 %v4905, %v4964
  %v5010 = vadd.f32 %v4906, %v4968
  %v5011 = vadd.f32 %v4907, %v4948
  %v5012 = vadd.f32 %v4908, %v4952
  %v5013 = vadd.f32 %v4909, %v4956
  %v5014 = vadd.f32 %v4910, %v4960
  %v5015 = vadd.f32 %v4911, %v4964
  %v5016 = vadd.f32 %v4912, %v4968
  %v5017 = vadd.f32 %v4913, %v4948
  %v5018 = vadd.f32 %v4914, %v4952
  %v5019 = vadd.f32 %v4915, %v4956
  %v5020 = vadd.f32 %v4916, %v4960
  %v5021 = vadd.f32 %v4917, %v4964
  %v5022 = vadd.f32 %v4918, %v4968
  %v5023 = vadd.f32 %v4919, %v4948
  %v5024 = vadd.f32 %v4920, %v4952
  %v5025 = vadd.f32 %v4921, %v4956
  %v5026 = vadd.f32 %v4922, %v4960
  %v5027 = vadd.f32 %v4923, %v4964
  %v5028 = vadd.f32 %v4924, %v4968
  %v5029 = vadd.f32 %v4925, %v4948
  %v5030 = vadd.f32 %v4926, %v4952
  %v5031 = vadd.f32 %v4927, %v4956
  %v5032 = vadd.f32 %v4928, %v4960
  %v5033 = vadd.f32 %v4929, %v4964
  %v5034 = vadd.f32 %v4930, %v4968
  %v5035 = vadd.f32 %v4931, %v4948
  %v5036 = vadd.f32 %v4932, %v4952
  %v5037 = vadd.f32 %v4933, %v4956
  %v5038 = vadd.f32 %v4934, %v4960
  %v5039 = vadd.f32 %v4935, %v4964
  %v5040 = vadd.f32 %v4936, %v4968
  %v5041 = vadd.f32 %v4937, %v4948
  %v5042 = vadd.f32 %v4938, %v4952
  %v5043 = vadd.f32 %v4939, %v4956
  %v5044 = vadd.f32 %v4940, %v4960
  %v5045 = vadd.f32 %v4941, %v4964
  %v5046 = vadd.f32 %v4942, %v4968
  %v5047 = vmax.f32 %v4975, 0.0
  %v5048 = vmax.f32 %v4976, 0.0
  %v5049 = vmax.f32 %v4977, 0.0
  %v5050 = vmax.f32 %v4978, 0.0
  %v5051 = vmax.f32 %v4979, 0.0
  %v5052 = vmax.f32 %v4980, 0.0
  %v5053 = vmax.f32 %v4981, 0.0
  %v5054 = vmax.f32 %v4982, 0.0
  %v5055 = vmax.f32 %v4983, 0.0
  %v5056 = vmax.f32 %v4984, 0.0
  %v5057 = vmax.f32 %v4985, 0.0
  %v5058 = vmax.f32 %v4986, 0.0
  %v5059 = vmax.f32 %v4987, 0.0
  %v5060 = vmax.f32 %v4988, 0.0
  %v5061 = vmax.f32 %v4989, 0.0
  %v5062 = vmax.f32 %v4990, 0.0
  %v5063 = vmax.f32 %v4991, 0.0
  %v5064 = vmax.f32 %v4992, 0.0
  %v5065 = vmax.f32 %v4993, 0.0
  %v5066 = vmax.f32 %v4994, 0.0
  %v5067 = vmax.f32 %v4995, 0.0
  %v5068 = vmax.f32 %v4996, 0.0
  %v5069 = vmax.f32 %v4997, 0.0
  %v5070 = vmax.f32 %v4998, 0.0
  %v5071 = vmax.f32 %v4999, 0.0
  %v5072 = vmax.f32 %v5000, 0.0
  %v5073 = vmax.f32 %v5001, 0.0
  %v5074 = vmax.f32 %v5002, 0.0
  %v5075 = vmax.f32 %v5003, 0.0
  %v5076 = vmax.f32 %v5004, 0.0
  %v5077 = vmax.f32 %v5005, 0.0
  %v5078 = vmax.f32 %v5006, 0.0
  %v5079 = vmax.f32 %v5007, 0.0
  %v5080 = vmax.f32 %v5008, 0.0
  %v5081 = vmax.f32 %v5009, 0.0
  %v5082 = vmax.f32 %v5010, 0.0
  %v5083 = vmax.f32 %v5011, 0.0
  %v5084 = vmax.f32 %v5012, 0.0
  %v5085 = vmax.f32 %v5013, 0.0
  %v5086 = vmax.f32 %v5014, 0.0
  %v5087 = vmax.f32 %v5015, 0.0
  %v5088 = vmax.f32 %v5016, 0.0
  %v5089 = vmax.f32 %v5017, 0.0
  %v5090 = vmax.f32 %v5018, 0.0
  %v5091 = vmax.f32 %v5019, 0.0
  %v5092 = vmax.f32 %v5020, 0.0
  %v5093 = vmax.f32 %v5021, 0.0
  %v5094 = vmax.f32 %v5022, 0.0
  %v5095 = vmax.f32 %v5023, 0.0
  %v5096 = vmax.f32 %v5024, 0.0
  %v5097 = vmax.f32 %v5025, 0.0
  %v5098 = vmax.f32 %v5026, 0.0
  %v5099 = vmax.f32 %v5027, 0.0
  %v5100 = vmax.f32 %v5028, 0.0
  %v5101 = vmax.f32 %v5029, 0.0
  %v5102 = vmax.f32 %v5030, 0.0
  %v5103 = vmax.f32 %v5031, 0.0
  %v5104 = vmax.f32 %v5032, 0.0
  %v5105 = vmax.f32 %v5033, 0.0
  %v5106 = vmax.f32 %v5034, 0.0
  %v5107 = vmax.f32 %v5035, 0.0
  %v5108 = vmax.f32 %v5036, 0.0
  %v5109 = vmax.f32 %v5037, 0.0
  %v5110 = vmax.f32 %v5038, 0.0
  %v5111 = vmax.f32 %v5039, 0.0
  %v5112 = vmax.f32 %v5040, 0.0
  %v5113 = vmax.f32 %v5041, 0.0
  %v5114 = vmax.f32 %v5042, 0.0
  %v5115 = vmax.f32 %v5043, 0.0
  %v5116 = vmax.f32 %v5044, 0.0
  %v5117 = vmax.f32 %v5045, 0.0
  %v5118 = vmax.f32 %v5046, 0.0
  %v5119 = vmax.f32 %v5047, %v5050
  %v5120 = vmax.f32 %v5048, %v5051
  %v5121 = vmax.f32 %v5049, %v5052
  %v5122 = vmax.f32 %v5053, %v5056
  %v5123 = vmax.f32 %v5054, %v5057
  %v5124 = vmax.f32 %v5055, %v5058
  %v5125 = vmax.f32 %v5059, %v5062
  %v5126 = vmax.f32 %v5060, %v5063
  %v5127 = vmax.f32 %v5061, %v5064
  %v5128 = vmax.f32 %v5065, %v5068
  %v5129 = vmax.f32 %v5066, %v5069
  %v5130 = vmax.f32 %v5067, %v5070
  %v5131 = vmax.f32 %v5071, %v5074
  %v5132 = vmax.f32 %v5072, %v5075
  %v5133 = vmax.f32 %v5073, %v5076
  %v5134 = vmax.f32 %v5077, %v5080
  %v5135 = vmax.f32 %v5078, %v5081
  %v5136 = vmax.f32 %v5079, %v5082
  %v5137 = vmax.f32 %v5083, %v5086
  %v5138 = vmax.f32 %v5084, %v5087
  %v5139 = vmax.f32 %v5085, %v5088
  %v5140 = vmax.f32 %v5089, %v5092
  %v5141 = vmax.f32 %v5090, %v5093
  %v5142 = vmax.f32 %v5091, %v5094
  %v5143 = vmax.f32 %v5095, %v5098
  %v5144 = vmax.f32 %v5096, %v5099
  %v5145 = vmax.f32 %v5097, %v5100
  %v5146 = vmax.f32 %v5101, %v5104
  %v5147 = vmax.f32 %v5102, %v5105
  %v5148 = vmax.f32 %v5103, %v5106
  %v5149 = vmax.f32 %v5107, %v5110
  %v5150 = vmax.f32 %v5108, %v5111
  %v5151 = vmax.f32 %v5109, %v5112
  %v5152 = vmax.f32 %v5113, %v5116
  %v5153 = vmax.f32 %v5114, %v5117
  %v5154 = vmax.f32 %v5115, %v5118
  %5155 = vst [vmem:[#allocation2] sm:$0xff] %v5119
  %5156 = vst [vmem:[#allocation2 + $0x8] sm:$0xff] %v5120
  %5157 = vst [vmem:[#allocation2 + $0x10] sm:$0xff] %v5121
  %5158 = vst [vmem:[#allocation2 + $0x18] sm:$0xff] %v5122
  %5159 = vst [vmem:[#allocation2 + $0x20] sm:$0xff] %v5123
  %5160 = vst [vmem:[#allocation2 + $0x28] sm:$0xff] %v5124
  %5161 = vst [vmem:[#allocation2 + $0x30] sm:$0xff] %v5125
  %5162 = vst [vmem:[#allocation2 + $0x38] sm:$0xff] %v5126
  %5163 = vst [vmem:[#allocation2 + $0x40] sm:$0xff] %v5127
  %5164 = vst [vmem:[#allocation2 + $0x48] sm:$0xff] %v5128
  %5165 = vst [vmem:[#allocation2 + $0x50] sm:$0xff] %v5129
  %5166 = vst [vmem:[#allocation2 + $0x58] sm:$0xff] %v5130
  %5167 = vst [vmem:[#allocation2 + $0x60] sm:$0xff] %v5131
  %5168 = vst [vmem:[#allocation2 + $0x68] sm:$0xff] %v5132
  %5169 = vst [vmem:[#allocation2 + $0x70] sm:$0xff] %v5133
  %5170 = vst [vmem:[#allocation2 + $0x78] sm:$0xff] %v5134
  %5171 = vst [vmem:[#allocation2 + $0x80] sm:$0xff] %v5135
  %5172 = vst [vmem:[#allocation2 + $0x88] sm:$0xff] %v5136
  %5173 = vst [vmem:[#allocation2 + $0x90] sm:$0xff] %v5137
  %5174 = vst [vmem:[#allocation2 + $0x98] sm:$0xff] %v5138
  %5175 = vst [vmem:[#allocation2 + $0xa0] sm:$0xff] %v5139
  %5176 = vst [vmem:[#allocation2 + $0xa8] sm:$0xff] %v5140
  %5177 = vst [vmem:[#allocation2 + $0xb0] sm:$0xff] %v5141
  %5178 = vst [vmem:[#allocation2 + $0xb8] sm:$0xff] %v5142
  %5179 = vst [vmem:[#allocation2 + $0xc0] sm:$0xff] %v5143
  %5180 = vst [vmem:[#allocation2 + $0xc8] sm:$0xff] %v5144
  %5181 = vst [vmem:[#allocation2 + $0xd0] sm:$0xff] %v5145
  %5182 = vst [vmem:[#allocation2 + $0xd8] sm:$0xff] %v5146
  %5183 = vst [vmem:[#allocation2 + $0xe0] sm:$0xff] %v5147
  %5184 = vst [vmem:[#allocation2 + $0xe8] sm:$0xff] %v5148
  %5185 = vst [vmem:[#allocation2 + $0xf0] sm:$0xff] %v5149
  %5186 = vst [vmem:[#allocation2 + $0xf8] sm:$0xff] %v5150
  %5187 = vst [vmem:[#allocation2 + $0x100] sm:$0xff] %v5151
  %5188 = vst [vmem:[#allocation2 + $0x108] sm:$0xff] %v5152
  %5189 = vst [vmem:[#allocation2 + $0x110] sm:$0xff] %v5153
  %5190 = vst [vmem:[#allocation2 + $0x118] sm:$0xff] %v5154
  %v5191 = vld [vmem:[#allocation2] sm:$0xff]
  %v5192 = vld [vmem:[#allocation2 + $0x8] sm:$0xff]
  %v5193 = vld [vmem:[#allocation2 + $0x10] sm:$0xff]
  %v5194 = vld [vmem:[#allocation2 + $0x18] sm:$0xff]
  %v5195 = vld [vmem:[#allocation2 + $0x20] sm:$0xff]
  %v5196 = vld [vmem:[#allocation2 + $0x28] sm:$0xff]
  %v5197 = vld [vmem:[#allocation2 + $0x30] sm:$0xff]
  %v5198 = vld [vmem:[#allocation2 + $0x38] sm:$0xff]
  %v5199 = vld [vmem:[#allocation2 + $0x40] sm:$0xff]
  %v5200 = vld [vmem:[#allocation2 + $0x48] sm:$0xff]
  %v5201 = vld [vmem:[#allocation2 + $0x50] sm:$0xff]
  %v5202 = vld [vmem:[#allocation2 + $0x58] sm:$0xff]
  %v5203 = vld [vmem:[%s5] sm:$0xf]
  %v5204 = vld [vmem:[%s5 + $0x4] sm:$0xf]
  %v5205 = vld [vmem:[%s5 + $0x8] sm:$0xf]
  %v5206 = vld [vmem:[%s5 + $0xc] sm:$0xf]
  %v5207 = vld [vmem:[%s5 + $0x10] sm:$0xf]
  %v5208 = vld [vmem:[%s5 + $0x14] sm:$0xf]
  %v5209 = vld [vmem:[%s5 + $0x18] sm:$0xf]
  %v5210 = vld [vmem:[%s5 + $0x1c] sm:$0xf]
  %v5211 = vld [vmem:[%s5 + $0x20] sm:$0xf]
  %v5212 = vld [vmem:[%s5 + $0x24] sm:$0xf]
  %v5213 = vld [vmem:[%s5 + $0x28] sm:$0xf]
  %v5214 = vld [vmem:[%s5 + $0x2c] sm:$0xf]
  %v5215 = vld [vmem:[%s5 + $0x30] sm:$0xf]
  %v5216 = vld [vmem:[%s5 + $0x34] sm:$0xf]
  %v5217 = vld [vmem:[%s5 + $0x38] sm:$0xf]
  %v5218 = vld [vmem:[%s5 + $0x3c] sm:$0xf]
  %v5219 = vld [vmem:[%s5 + $0x40] sm:$0xf]
  %v5220 = vld [vmem:[%s5 + $0x44] sm:$0xf]
  %v5221 = vld [vmem:[%s5 + $0x48] sm:$0xf]
  %v5222 = vld [vmem:[%s5 + $0x4c] sm:$0xf]
  %v5223 = vld [vmem:[%s5 + $0x50] sm:$0xf]
  %v5224 = vld [vmem:[%s5 + $0x54] sm:$0xf]
  %v5225 = vld [vmem:[%s5 + $0x58] sm:$0xf]
  %v5226 = vld [vmem:[%s5 + $0x5c] sm:$0xf]
  %v5227 = vld [vmem:[%s5 + $0x60] sm:$0xf]
  %v5228 = vld [vmem:[%s5 + $0x64] sm:$0xf]
  %v5229 = vld [vmem:[%s5 + $0x68] sm:$0xf]
  %v5230 = vld [vmem:[%s5 + $0x6c] sm:$0xf]
  %v5231 = vld [vmem:[%s5 + $0x70] sm:$0xf]
  %v5232 = vld [vmem:[%s5 + $0x74] sm:$0xf]
  %v5233 = vld [vmem:[%s5 + $0x78] sm:$0xf]
  %v5234 = vld [vmem:[%s5 + $0x7c] sm:$0xf]
  %v5235 = vld [vmem:[%s5 + $0x80] sm:$0xf]
  %v5236 = vld [vmem:[%s5 + $0x84] sm:$0xf]
  %v5237 = vld [vmem:[%s5 + $0x88] sm:$0xf]
  %v5238 = vld [vmem:[%s5 + $0x8c] sm:$0xf]
  %v5239 = vld [vmem:[%s5 + $0x90] sm:$0xf]
  %v5240 = vld [vmem:[%s5 + $0x94] sm:$0xf]
  %v5241 = vld [vmem:[%s5 + $0x98] sm:$0xf]
  %v5242 = vld [vmem:[%s5 + $0x9c] sm:$0xf]
  %v5243 = vld [vmem:[%s5 + $0xa0] sm:$0xf]
  %v5244 = vld [vmem:[%s5 + $0xa4] sm:$0xf]
  %v5245 = vld [vmem:[%s5 + $0xa8] sm:$0xf]
  %v5246 = vld [vmem:[%s5 + $0xac] sm:$0xf]
  %v5247 = vld [vmem:[%s5 + $0xb0] sm:$0xf]
  %v5248 = vld [vmem:[%s5 + $0xb4] sm:$0xf]
  %v5249 = vld [vmem:[%s5 + $0xb8] sm:$0xf]
  %v5250 = vld [vmem:[%s5 + $0xbc] sm:$0xf]
  %v5251 = vld [vmem:[%s6] sm:$0xf]
  %v5252 = vld [vmem:[%s6 + $0x4] sm:$0xf]
  %v5253 = vld [vmem:[%s6 + $0x8] sm:$0xf]
  %v5254 = vld [vmem:[%s6 + $0xc] sm:$0xf]
  %v5255 = vld [vmem:[%s6 + $0x10] sm:$0xf]
  %v5256 = vld [vmem:[%s6 + $0x14] sm:$0xf]
  %v5257 = vld [vmem:[%s6 + $0x18] sm:$0xf]
  %v5258 = vld [vmem:[%s6 + $0x1c] sm:$0xf]
  %v5259 = vld [vmem:[%s6 + $0x20] sm:$0xf]
  %v5260 = vld [vmem:[%s6 + $0x24] sm:$0xf]
  %v5261 = vld [vmem:[%s6 + $0x28] sm:$0xf]
  %v5262 = vld [vmem:[%s6 + $0x2c] sm:$0xf]
  %v5263 = vld [vmem:[%s6 + $0x30] sm:$0xf]
  %v5264 = vld [vmem:[%s6 + $0x34] sm:$0xf]
  %v5265 = vld [vmem:[%s6 + $0x38] sm:$0xf]
  %v5266 = vld [vmem:[%s6 + $0x3c] sm:$0xf]
  %v5267 = vld [vmem:[%s6 + $0x40] sm:$0xf]
  %v5268 = vld [vmem:[%s6 + $0x44] sm:$0xf]
  %v5269 = vld [vmem:[%s6 + $0x48] sm:$0xf]
  %v5270 = vld [vmem:[%s6 + $0x4c] sm:$0xf]
  %v5271 = vld [vmem:[%s6 + $0x50] sm:$0xf]
  %v5272 = vld [vmem:[%s6 + $0x54] sm:$0xf]
  %v5273 = vld [vmem:[%s6 + $0x58] sm:$0xf]
  %v5274 = vld [vmem:[%s6 + $0x5c] sm:$0xf]
  %v5275 = vld [vmem:[%s6 + $0x60] sm:$0xf]
  %v5276 = vld [vmem:[%s6 + $0x64] sm:$0xf]
  %v5277 = vld [vmem:[%s6 + $0x68] sm:$0xf]
  %v5278 = vld [vmem:[%s6 + $0x6c] sm:$0xf]
  %v5279 = vld [vmem:[%s6 + $0x70] sm:$0xf]
  %v5280 = vld [vmem:[%s6 + $0x74] sm:$0xf]
  %v5281 = vld [vmem:[%s6 + $0x78] sm:$0xf]
  %v5282 = vld [vmem:[%s6 + $0x7c] sm:$0xf]
  %v5283 = vld [vmem:[%s6 + $0x80] sm:$0xf]
  %v5284 = vld [vmem:[%s6 + $0x84] sm:$0xf]
  %v5285 = vld [vmem:[%s6 + $0x88] sm:$0xf]
  %v5286 = vld [vmem:[%s6 + $0x8c] sm:$0xf]
  %v5287 = vld [vmem:[%s6 + $0x90] sm:$0xf]
  %v5288 = vld [vmem:[%s6 + $0x94] sm:$0xf]
  %v5289 = vld [vmem:[%s6 + $0x98] sm:$0xf]
  %v5290 = vld [vmem:[%s6 + $0x9c] sm:$0xf]
  %v5291 = vld [vmem:[%s6 + $0xa0] sm:$0xf]
  %v5292 = vld [vmem:[%s6 + $0xa4] sm:$0xf]
  %v5293 = vld [vmem:[%s6 + $0xa8] sm:$0xf]
  %v5294 = vld [vmem:[%s6 + $0xac] sm:$0xf]
  %v5295 = vld [vmem:[%s6 + $0xb0] sm:$0xf]
  %v5296 = vld [vmem:[%s6 + $0xb4] sm:$0xf]
  %v5297 = vld [vmem:[%s6 + $0xb8] sm:$0xf]
  %v5298 = vld [vmem:[%s6 + $0xbc] sm:$0xf]
  %v5299 = vpack.c.bf16 %v5194, %v5191
  %v5300 = vpack.c.bf16 %v5195, %v5192
  %v5301 = vpack.c.bf16 %v5196, %v5193
  %v5302 = vpack.c.bf16 %v5200, %v5197
  %v5303 = vpack.c.bf16 %v5201, %v5198
  %v5304 = vpack.c.bf16 %v5202, %v5199
  %v5305 = vunpack.c.l.bf16 %v5299
  %v5306 = vunpack.c.l.bf16 %v5300
  %v5307 = vunpack.c.l.bf16 %v5301
  %v5308 = vunpack.c.h.bf16 %v5299
  %v5309 = vunpack.c.h.bf16 %v5300
  %v5310 = vunpack.c.h.bf16 %v5301
  %v5311 = vunpack.c.l.bf16 %v5302
  %v5312 = vunpack.c.l.bf16 %v5303
  %v5313 = vunpack.c.l.bf16 %v5304
  %v5314 = vunpack.c.h.bf16 %v5302
  %v5315 = vunpack.c.h.bf16 %v5303
  %v5316 = vunpack.c.h.bf16 %v5304
  %v5317 = vsub.f32 %v5191, %v5305
  %v5318 = vsub.f32 %v5192, %v5306
  %v5319 = vsub.f32 %v5193, %v5307
  %v5320 = vsub.f32 %v5194, %v5308
  %v5321 = vsub.f32 %v5195, %v5309
  %v5322 = vsub.f32 %v5196, %v5310
  %v5323 = vsub.f32 %v5197, %v5311
  %v5324 = vsub.f32 %v5198, %v5312
  %v5325 = vsub.f32 %v5199, %v5313
  %v5326 = vsub.f32 %v5200, %v5314
  %v5327 = vsub.f32 %v5201, %v5315
  %v5328 = vsub.f32 %v5202, %v5316
  %v5329 = vpack.c.bf16 %v5320, %v5317
  %v5330 = vpack.c.bf16 %v5321, %v5318
  %v5331 = vpack.c.bf16 %v5322, %v5319
  %v5332 = vpack.c.bf16 %v5326, %v5323
  %v5333 = vpack.c.bf16 %v5327, %v5324
  %v5334 = vpack.c.bf16 %v5328, %v5325
  %v5383 = vunpack.c.l.b16 %v5203
  %v5384 = vunpack.c.l.b16 %v5204
  %v5385 = vunpack.c.l.b16 %v5205
  %v5386 = vunpack.c.l.b16 %v5206
  %v5387 = vunpack.c.l.b16 %v5207
  %v5388 = vunpack.c.l.b16 %v5208
  %v5389 = vunpack.c.l.b16 %v5209
  %v5390 = vunpack.c.l.b16 %v5210
  %v5391 = vunpack.c.l.b16 %v5211
  %v5392 = vunpack.c.l.b16 %v5212
  %v5393 = vunpack.c.l.b16 %v5213
  %v5394 = vunpack.c.l.b16 %v5214
  %v5395 = vunpack.c.l.b16 %v5215
  %v5396 = vunpack.c.l.b16 %v5216
  %v5397 = vunpack.c.l.b16 %v5217
  %v5398 = vunpack.c.l.b16 %v5218
  %v5399 = vunpack.c.l.b16 %v5219
  %v5400 = vunpack.c.l.b16 %v5220
  %v5401 = vunpack.c.l.b16 %v5221
  %v5402 = vunpack.c.l.b16 %v5222
  %v5403 = vunpack.c.l.b16 %v5223
  %v5404 = vunpack.c.l.b16 %v5224
  %v5405 = vunpack.c.l.b16 %v5225
  %v5406 = vunpack.c.l.b16 %v5226
  %v5407 = vunpack.c.l.b16 %v5227
  %v5408 = vunpack.c.l.b16 %v5228
  %v5409 = vunpack.c.l.b16 %v5229
  %v5410 = vunpack.c.l.b16 %v5230
  %v5411 = vunpack.c.l.b16 %v5231
  %v5412 = vunpack.c.l.b16 %v5232
  %v5413 = vunpack.c.l.b16 %v5233
  %v5414 = vunpack.c.l.b16 %v5234
  %v5415 = vunpack.c.l.b16 %v5235
  %v5416 = vunpack.c.l.b16 %v5236
  %v5417 = vunpack.c.l.b16 %v5237
  %v5418 = vunpack.c.l.b16 %v5238
  %v5419 = vunpack.c.l.b16 %v5239
  %v5420 = vunpack.c.l.b16 %v5240
  %v5421 = vunpack.c.l.b16 %v5241
  %v5422 = vunpack.c.l.b16 %v5242
  %v5423 = vunpack.c.l.b16 %v5243
  %v5424 = vunpack.c.l.b16 %v5244
  %v5425 = vunpack.c.l.b16 %v5245
  %v5426 = vunpack.c.l.b16 %v5246
  %v5427 = vunpack.c.l.b16 %v5247
  %v5428 = vunpack.c.l.b16 %v5248
  %v5429 = vunpack.c.l.b16 %v5249
  %v5430 = vunpack.c.l.b16 %v5250
  %v5431 = vpack.c.b16 %v5384, %v5383
  %v5432 = vpack.c.b16 %v5386, %v5385
  %v5433 = vpack.c.b16 %v5388, %v5387
  %v5434 = vpack.c.b16 %v5390, %v5389
  %v5435 = vpack.c.b16 %v5392, %v5391
  %v5436 = vpack.c.b16 %v5394, %v5393
  %v5437 = vpack.c.b16 %v5396, %v5395
  %v5438 = vpack.c.b16 %v5398, %v5397
  %v5439 = vpack.c.b16 %v5400, %v5399
  %v5440 = vpack.c.b16 %v5402, %v5401
  %v5441 = vpack.c.b16 %v5404, %v5403
  %v5442 = vpack.c.b16 %v5406, %v5405
  %v5443 = vpack.c.b16 %v5408, %v5407
  %v5444 = vpack.c.b16 %v5410, %v5409
  %v5445 = vpack.c.b16 %v5412, %v5411
  %v5446 = vpack.c.b16 %v5414, %v5413
  %v5447 = vpack.c.b16 %v5416, %v5415
  %v5448 = vpack.c.b16 %v5418, %v5417
  %v5449 = vpack.c.b16 %v5420, %v5419
  %v5450 = vpack.c.b16 %v5422, %v5421
  %v5451 = vpack.c.b16 %v5424, %v5423
  %v5452 = vpack.c.b16 %v5426, %v5425
  %v5453 = vpack.c.b16 %v5428, %v5427
  %v5454 = vpack.c.b16 %v5430, %v5429
  %5479 = vmatprep.subr.bf16.mxu0 0
  %5480 = vmatpush1.bf16.msra.mxu0 %v5438
  %5481 = vmatprep.subr.bf16.mxu0 0
  %5482 = vmatpush1.bf16.msra.mxu0 %v5437
  %5483 = vmatprep.subr.bf16.mxu0 0
  %5484 = vmatpush1.bf16.msra.mxu0 %v5436
  %5485 = vmatprep.subr.bf16.mxu0 0
  %5486 = vmatpush1.bf16.msra.mxu0 %v5435
  %5487 = vmatprep.subr.bf16.mxu0 0
  %5488 = vmatpush1.bf16.msra.mxu0 %v5434
  %5489 = vmatprep.subr.bf16.mxu0 0
  %5490 = vmatpush1.bf16.msra.mxu0 %v5433
  %5491 = vmatprep.subr.bf16.mxu0 0
  %5492 = vmatpush1.bf16.msra.mxu0 %v5432
  %5493 = vmatprep.subr.bf16.mxu0 0
  %5494 = vmatpush1.bf16.msra.mxu0 %v5431
  %5495 = vmatprep.subr.bf16.mxu0 0
  %5496 = vmatpush2.bf16.msra.mxu0 %v5446
  %5497 = vmatprep.subr.bf16.mxu0 0
  %5498 = vmatpush2.bf16.msra.mxu0 %v5445
  %5499 = vmatprep.subr.bf16.mxu0 0
  %5500 = vmatpush2.bf16.msra.mxu0 %v5444
  %5501 = vmatprep.subr.bf16.mxu0 0
  %5502 = vmatpush2.bf16.msra.mxu0 %v5443
  %5503 = vmatprep.subr.bf16.mxu0 0
  %5504 = vmatpush2.bf16.msra.mxu0 %v5442
  %5505 = vmatprep.subr.bf16.mxu0 0
  %5506 = vmatpush2.bf16.msra.mxu0 %v5441
  %5507 = vmatprep.subr.bf16.mxu0 0
  %5508 = vmatpush2.bf16.msra.mxu0 %v5440
  %5509 = vmatprep.subr.bf16.mxu0 0
  %5510 = vmatpush2.bf16.msra.mxu0 %v5439
  %5511 = vmatprep.mubr.bf16.mxu0 %v5330
  %5512 = vmatmul.mubr.bf16.gmra.mxu0 %v5329
  %v5513 = vpop.f32.mrf.mxu0
  %v5514 = vadd.f32 0.0, %v5513
  %v5515 = vpop.f32.mrf.mxu0
  %v5516 = vpop.f32.mrf.mxu0
  %v5517 = vadd.f32 0.0, %v5516
  %v5518 = vpop.f32.mrf.mxu0
  %5519 = vmatprep.mubr.bf16.mxu0 %v5333
  %5520 = vmatmul.mubr.bf16.gmra.mxu0 %v5332
  %v5521 = vpop.f32.mrf.mxu0
  %v5522 = vadd.f32 0.0, %v5521
  %v5523 = vpop.f32.mrf.mxu0
  %v5524 = vpop.f32.mrf.mxu0
  %v5525 = vadd.f32 0.0, %v5524
  %v5526 = vpop.f32.mrf.mxu0
  %5527 = vdwg.mxu0
  %5528 = vmatprep.subr.bf16.mxu0 0
  %5529 = vmatpush1.bf16.msra.mxu0 %v5454
  %5530 = vmatprep.subr.bf16.mxu0 0
  %5531 = vmatpush1.bf16.msra.mxu0 %v5453
  %5532 = vmatprep.subr.bf16.mxu0 0
  %5533 = vmatpush1.bf16.msra.mxu0 %v5452
  %5534 = vmatprep.subr.bf16.mxu0 0
  %5535 = vmatpush1.bf16.msra.mxu0 %v5451
  %5536 = vmatprep.subr.bf16.mxu0 0
  %5537 = vmatpush1.bf16.msra.mxu0 %v5450
  %5538 = vmatprep.subr.bf16.mxu0 0
  %5539 = vmatpush1.bf16.msra.mxu0 %v5449
  %5540 = vmatprep.subr.bf16.mxu0 0
  %5541 = vmatpush1.bf16.msra.mxu0 %v5448
  %5542 = vmatprep.subr.bf16.mxu0 0
  %5543 = vmatpush1.bf16.msra.mxu0 %v5447
  %5544 = vmatprep.subr.bf16.mxu0 0
  %5545 = vmatpush2.bf16.msra.mxu0 0
  %5546 = vmatprep.subr.bf16.mxu0 0
  %5547 = vmatpush2.bf16.msra.mxu0 0
  %5548 = vmatprep.subr.bf16.mxu0 0
  %5549 = vmatpush2.bf16.msra.mxu0 0
  %5550 = vmatprep.subr.bf16.mxu0 0
  %5551 = vmatpush2.bf16.msra.mxu0 0
  %5552 = vmatprep.subr.bf16.mxu0 0
  %5553 = vmatpush2.bf16.msra.mxu0 0
  %5554 = vmatprep.subr.bf16.mxu0 0
  %5555 = vmatpush2.bf16.msra.mxu0 0
  %5556 = vmatprep.subr.bf16.mxu0 0
  %5557 = vmatpush2.bf16.msra.mxu0 0
  %5558 = vmatprep.subr.bf16.mxu0 0
  %5559 = vmatpush2.bf16.msra.mxu0 0
  %5560 = vmatprep.mubr.bf16.mxu0 0
  %5561 = vmatmul.mubr.bf16.gmra.mxu0 %v5331
  %v5562 = vpop.f32.mrf.mxu0
  %v5563 = vadd.f32 %v5514, %v5562
  %v5564 = vpop.f32.mrf.mxu0
  %v5565 = vpop.f32.mrf.mxu0
  %v5566 = vadd.f32 %v5517, %v5565
  %v5567 = vpop.f32.mrf.mxu0
  %5568 = vmatprep.mubr.bf16.mxu0 0
  %5569 = vmatmul.mubr.bf16.gmra.mxu0 %v5334
  %v5570 = vpop.f32.mrf.mxu0
  %v5571 = vadd.f32 %v5522, %v5570
  %v5572 = vpop.f32.mrf.mxu0
  %v5573 = vpop.f32.mrf.mxu0
  %v5574 = vadd.f32 %v5525, %v5573
  %v5575 = vpop.f32.mrf.mxu0
  %5576 = vdwg.mxu0
  %5577 = vmatprep.subr.bf16.mxu0 0
  %5578 = vmatpush1.bf16.msra.mxu0 %v5438
  %5579 = vmatprep.subr.bf16.mxu0 0
  %5580 = vmatpush1.bf16.msra.mxu0 %v5437
  %5581 = vmatprep.subr.bf16.mxu0 0
  %5582 = vmatpush1.bf16.msra.mxu0 %v5436
  %5583 = vmatprep.subr.bf16.mxu0 0
  %5584 = vmatpush1.bf16.msra.mxu0 %v5435
  %5585 = vmatprep.subr.bf16.mxu0 0
  %5586 = vmatpush1.bf16.msra.mxu0 %v5434
  %5587 = vmatprep.subr.bf16.mxu0 0
  %5588 = vmatpush1.bf16.msra.mxu0 %v5433
  %5589 = vmatprep.subr.bf16.mxu0 0
  %5590 = vmatpush1.bf16.msra.mxu0 %v5432
  %5591 = vmatprep.subr.bf16.mxu0 0
  %5592 = vmatpush1.bf16.msra.mxu0 %v5431
  %5593 = vmatprep.subr.bf16.mxu0 0
  %5594 = vmatpush2.bf16.msra.mxu0 %v5446
  %5595 = vmatprep.subr.bf16.mxu0 0
  %5596 = vmatpush2.bf16.msra.mxu0 %v5445
  %5597 = vmatprep.subr.bf16.mxu0 0
  %5598 = vmatpush2.bf16.msra.mxu0 %v5444
  %5599 = vmatprep.subr.bf16.mxu0 0
  %5600 = vmatpush2.bf16.msra.mxu0 %v5443
  %5601 = vmatprep.subr.bf16.mxu0 0
  %5602 = vmatpush2.bf16.msra.mxu0 %v5442
  %5603 = vmatprep.subr.bf16.mxu0 0
  %5604 = vmatpush2.bf16.msra.mxu0 %v5441
  %5605 = vmatprep.subr.bf16.mxu0 0
  %5606 = vmatpush2.bf16.msra.mxu0 %v5440
  %5607 = vmatprep.subr.bf16.mxu0 0
  %5608 = vmatpush2.bf16.msra.mxu0 %v5439
  %5609 = vmatprep.mubr.bf16.mxu0 %v5300
  %5610 = vmatmul.mubr.bf16.gmra.mxu0 %v5299
  %v5611 = vpop.f32.mrf.mxu0
  %v5612 = vadd.f32 %v5563, %v5611
  %v5613 = vpop.f32.mrf.mxu0
  %v5614 = vpop.f32.mrf.mxu0
  %v5615 = vadd.f32 %v5566, %v5614
  %v5616 = vpop.f32.mrf.mxu0
  %5617 = vmatprep.mubr.bf16.mxu0 %v5303
  %5618 = vmatmul.mubr.bf16.gmra.mxu0 %v5302
  %v5619 = vpop.f32.mrf.mxu0
  %v5620 = vadd.f32 %v5571, %v5619
  %v5621 = vpop.f32.mrf.mxu0
  %v5622 = vpop.f32.mrf.mxu0
  %v5623 = vadd.f32 %v5574, %v5622
  %v5624 = vpop.f32.mrf.mxu0
  %5625 = vdwg.mxu0
  %5626 = vmatprep.subr.bf16.mxu0 0
  %5627 = vmatpush1.bf16.msra.mxu0 %v5454
  %5628 = vmatprep.subr.bf16.mxu0 0
  %5629 = vmatpush1.bf16.msra.mxu0 %v5453
  %5630 = vmatprep.subr.bf16.mxu0 0
  %5631 = vmatpush1.bf16.msra.mxu0 %v5452
  %5632 = vmatprep.subr.bf16.mxu0 0
  %5633 = vmatpush1.bf16.msra.mxu0 %v5451
  %5634 = vmatprep.subr.bf16.mxu0 0
  %5635 = vmatpush1.bf16.msra.mxu0 %v5450
  %5636 = vmatprep.subr.bf16.mxu0 0
  %5637 = vmatpush1.bf16.msra.mxu0 %v5449
  %5638 = vmatprep.subr.bf16.mxu0 0
  %5639 = vmatpush1.bf16.msra.mxu0 %v5448
  %5640 = vmatprep.subr.bf16.mxu0 0
  %5641 = vmatpush1.bf16.msra.mxu0 %v5447
  %5642 = vmatprep.subr.bf16.mxu0 0
  %5643 = vmatpush2.bf16.msra.mxu0 0
  %5644 = vmatprep.subr.bf16.mxu0 0
  %5645 = vmatpush2.bf16.msra.mxu0 0
  %5646 = vmatprep.subr.bf16.mxu0 0
  %5647 = vmatpush2.bf16.msra.mxu0 0
  %5648 = vmatprep.subr.bf16.mxu0 0
  %5649 = vmatpush2.bf16.msra.mxu0 0
  %5650 = vmatprep.subr.bf16.mxu0 0
  %5651 = vmatpush2.bf16.msra.mxu0 0
  %5652 = vmatprep.subr.bf16.mxu0 0
  %5653 = vmatpush2.bf16.msra.mxu0 0
  %5654 = vmatprep.subr.bf16.mxu0 0
  %5655 = vmatpush2.bf16.msra.mxu0 0
  %5656 = vmatprep.subr.bf16.mxu0 0
  %5657 = vmatpush2.bf16.msra.mxu0 0
  %5658 = vmatprep.mubr.bf16.mxu0 0
  %5659 = vmatmul.mubr.bf16.gmra.mxu0 %v5301
  %v5660 = vpop.f32.mrf.mxu0
  %v5661 = vadd.f32 %v5612, %v5660
  %v5662 = vpop.f32.mrf.mxu0
  %v5663 = vpop.f32.mrf.mxu0
  %v5664 = vadd.f32 %v5615, %v5663
  %v5665 = vpop.f32.mrf.mxu0
  %5666 = vmatprep.mubr.bf16.mxu0 0
  %5667 = vmatmul.mubr.bf16.gmra.mxu0 %v5304
  %v5668 = vpop.f32.mrf.mxu0
  %v5669 = vadd.f32 %v5620, %v5668
  %v5670 = vpop.f32.mrf.mxu0
  %v5671 = vpop.f32.mrf.mxu0
  %v5672 = vadd.f32 %v5623, %v5671
  %v5673 = vpop.f32.mrf.mxu0
  %5674 = vdwg.mxu0
  %v5723 = vunpack.c.l.b16 %v5251
  %v5724 = vunpack.c.l.b16 %v5252
  %v5725 = vunpack.c.l.b16 %v5253
  %v5726 = vunpack.c.l.b16 %v5254
  %v5727 = vunpack.c.l.b16 %v5255
  %v5728 = vunpack.c.l.b16 %v5256
  %v5729 = vunpack.c.l.b16 %v5257
  %v5730 = vunpack.c.l.b16 %v5258
  %v5731 = vunpack.c.l.b16 %v5259
  %v5732 = vunpack.c.l.b16 %v5260
  %v5733 = vunpack.c.l.b16 %v5261
  %v5734 = vunpack.c.l.b16 %v5262
  %v5735 = vunpack.c.l.b16 %v5263
  %v5736 = vunpack.c.l.b16 %v5264
  %v5737 = vunpack.c.l.b16 %v5265
  %v5738 = vunpack.c.l.b16 %v5266
  %v5739 = vunpack.c.l.b16 %v5267
  %v5740 = vunpack.c.l.b16 %v5268
  %v5741 = vunpack.c.l.b16 %v5269
  %v5742 = vunpack.c.l.b16 %v5270
  %v5743 = vunpack.c.l.b16 %v5271
  %v5744 = vunpack.c.l.b16 %v5272
  %v5745 = vunpack.c.l.b16 %v5273
  %v5746 = vunpack.c.l.b16 %v5274
  %v5747 = vunpack.c.l.b16 %v5275
  %v5748 = vunpack.c.l.b16 %v5276
  %v5749 = vunpack.c.l.b16 %v5277
  %v5750 = vunpack.c.l.b16 %v5278
  %v5751 = vunpack.c.l.b16 %v5279
  %v5752 = vunpack.c.l.b16 %v5280
  %v5753 = vunpack.c.l.b16 %v5281
  %v5754 = vunpack.c.l.b16 %v5282
  %v5755 = vunpack.c.l.b16 %v5283
  %v5756 = vunpack.c.l.b16 %v5284
  %v5757 = vunpack.c.l.b16 %v5285
  %v5758 = vunpack.c.l.b16 %v5286
  %v5759 = vunpack.c.l.b16 %v5287
  %v5760 = vunpack.c.l.b16 %v5288
  %v5761 = vunpack.c.l.b16 %v5289
  %v5762 = vunpack.c.l.b16 %v5290
  %v5763 = vunpack.c.l.b16 %v5291
  %v5764 = vunpack.c.l.b16 %v5292
  %v5765 = vunpack.c.l.b16 %v5293
  %v5766 = vunpack.c.l.b16 %v5294
  %v5767 = vunpack.c.l.b16 %v5295
  %v5768 = vunpack.c.l.b16 %v5296
  %v5769 = vunpack.c.l.b16 %v5297
  %v5770 = vunpack.c.l.b16 %v5298
  %v5771 = vpack.c.b16 %v5724, %v5723
  %v5772 = vpack.c.b16 %v5726, %v5725
  %v5773 = vpack.c.b16 %v5728, %v5727
  %v5774 = vpack.c.b16 %v5730, %v5729
  %v5775 = vpack.c.b16 %v5732, %v5731
  %v5776 = vpack.c.b16 %v5734, %v5733
  %v5777 = vpack.c.b16 %v5736, %v5735
  %v5778 = vpack.c.b16 %v5738, %v5737
  %v5779 = vpack.c.b16 %v5740, %v5739
  %v5780 = vpack.c.b16 %v5742, %v5741
  %v5781 = vpack.c.b16 %v5744, %v5743
  %v5782 = vpack.c.b16 %v5746, %v5745
  %v5783 = vpack.c.b16 %v5748, %v5747
  %v5784 = vpack.c.b16 %v5750, %v5749
  %v5785 = vpack.c.b16 %v5752, %v5751
  %v5786 = vpack.c.b16 %v5754, %v5753
  %v5787 = vpack.c.b16 %v5756, %v5755
  %v5788 = vpack.c.b16 %v5758, %v5757
  %v5789 = vpack.c.b16 %v5760, %v5759
  %v5790 = vpack.c.b16 %v5762, %v5761
  %v5791 = vpack.c.b16 %v5764, %v5763
  %v5792 = vpack.c.b16 %v5766, %v5765
  %v5793 = vpack.c.b16 %v5768, %v5767
  %v5794 = vpack.c.b16 %v5770, %v5769
  %5819 = vmatprep.subr.bf16.mxu0 0
  %5820 = vmatpush1.bf16.msra.mxu0 %v5778
  %5821 = vmatprep.subr.bf16.mxu0 0
  %5822 = vmatpush1.bf16.msra.mxu0 %v5777
  %5823 = vmatprep.subr.bf16.mxu0 0
  %5824 = vmatpush1.bf16.msra.mxu0 %v5776
  %5825 = vmatprep.subr.bf16.mxu0 0
  %5826 = vmatpush1.bf16.msra.mxu0 %v5775
  %5827 = vmatprep.subr.bf16.mxu0 0
  %5828 = vmatpush1.bf16.msra.mxu0 %v5774
  %5829 = vmatprep.subr.bf16.mxu0 0
  %5830 = vmatpush1.bf16.msra.mxu0 %v5773
  %5831 = vmatprep.subr.bf16.mxu0 0
  %5832 = vmatpush1.bf16.msra.mxu0 %v5772
  %5833 = vmatprep.subr.bf16.mxu0 0
  %5834 = vmatpush1.bf16.msra.mxu0 %v5771
  %5835 = vmatprep.subr.bf16.mxu0 0
  %5836 = vmatpush2.bf16.msra.mxu0 %v5786
  %5837 = vmatprep.subr.bf16.mxu0 0
  %5838 = vmatpush2.bf16.msra.mxu0 %v5785
  %5839 = vmatprep.subr.bf16.mxu0 0
  %5840 = vmatpush2.bf16.msra.mxu0 %v5784
  %5841 = vmatprep.subr.bf16.mxu0 0
  %5842 = vmatpush2.bf16.msra.mxu0 %v5783
  %5843 = vmatprep.subr.bf16.mxu0 0
  %5844 = vmatpush2.bf16.msra.mxu0 %v5782
  %5845 = vmatprep.subr.bf16.mxu0 0
  %5846 = vmatpush2.bf16.msra.mxu0 %v5781
  %5847 = vmatprep.subr.bf16.mxu0 0
  %5848 = vmatpush2.bf16.msra.mxu0 %v5780
  %5849 = vmatprep.subr.bf16.mxu0 0
  %5850 = vmatpush2.bf16.msra.mxu0 %v5779
  %5851 = vmatprep.mubr.bf16.mxu0 %v5300
  %5852 = vmatmul.mubr.bf16.gmra.mxu0 %v5299
  %v5853 = vpop.f32.mrf.mxu0
  %v5854 = vadd.f32 0.0, %v5853
  %v5855 = vpop.f32.mrf.mxu0
  %v5856 = vpop.f32.mrf.mxu0
  %v5857 = vadd.f32 0.0, %v5856
  %v5858 = vpop.f32.mrf.mxu0
  %5859 = vmatprep.mubr.bf16.mxu0 %v5303
  %5860 = vmatmul.mubr.bf16.gmra.mxu0 %v5302
  %v5861 = vpop.f32.mrf.mxu0
  %v5862 = vadd.f32 0.0, %v5861
  %v5863 = vpop.f32.mrf.mxu0
  %v5864 = vpop.f32.mrf.mxu0
  %v5865 = vadd.f32 0.0, %v5864
  %v5866 = vpop.f32.mrf.mxu0
  %5867 = vdwg.mxu0
  %5868 = vmatprep.subr.bf16.mxu0 0
  %5869 = vmatpush1.bf16.msra.mxu0 %v5794
  %5870 = vmatprep.subr.bf16.mxu0 0
  %5871 = vmatpush1.bf16.msra.mxu0 %v5793
  %5872 = vmatprep.subr.bf16.mxu0 0
  %5873 = vmatpush1.bf16.msra.mxu0 %v5792
  %5874 = vmatprep.subr.bf16.mxu0 0
  %5875 = vmatpush1.bf16.msra.mxu0 %v5791
  %5876 = vmatprep.subr.bf16.mxu0 0
  %5877 = vmatpush1.bf16.msra.mxu0 %v5790
  %5878 = vmatprep.subr.bf16.mxu0 0
  %5879 = vmatpush1.bf16.msra.mxu0 %v5789
  %5880 = vmatprep.subr.bf16.mxu0 0
  %5881 = vmatpush1.bf16.msra.mxu0 %v5788
  %5882 = vmatprep.subr.bf16.mxu0 0
  %5883 = vmatpush1.bf16.msra.mxu0 %v5787
  %5884 = vmatprep.subr.bf16.mxu0 0
  %5885 = vmatpush2.bf16.msra.mxu0 0
  %5886 = vmatprep.subr.bf16.mxu0 0
  %5887 = vmatpush2.bf16.msra.mxu0 0
  %5888 = vmatprep.subr.bf16.mxu0 0
  %5889 = vmatpush2.bf16.msra.mxu0 0
  %5890 = vmatprep.subr.bf16.mxu0 0
  %5891 = vmatpush2.bf16.msra.mxu0 0
  %5892 = vmatprep.subr.bf16.mxu0 0
  %5893 = vmatpush2.bf16.msra.mxu0 0
  %5894 = vmatprep.subr.bf16.mxu0 0
  %5895 = vmatpush2.bf16.msra.mxu0 0
  %5896 = vmatprep.subr.bf16.mxu0 0
  %5897 = vmatpush2.bf16.msra.mxu0 0
  %5898 = vmatprep.subr.bf16.mxu0 0
  %5899 = vmatpush2.bf16.msra.mxu0 0
  %5900 = vmatprep.mubr.bf16.mxu0 0
  %5901 = vmatmul.mubr.bf16.gmra.mxu0 %v5301
  %v5902 = vpop.f32.mrf.mxu0
  %v5903 = vadd.f32 %v5854, %v5902
  %v5904 = vpop.f32.mrf.mxu0
  %v5905 = vpop.f32.mrf.mxu0
  %v5906 = vadd.f32 %v5857, %v5905
  %v5907 = vpop.f32.mrf.mxu0
  %5908 = vmatprep.mubr.bf16.mxu0 0
  %5909 = vmatmul.mubr.bf16.gmra.mxu0 %v5304
  %v5910 = vpop.f32.mrf.mxu0
  %v5911 = vadd.f32 %v5862, %v5910
  %v5912 = vpop.f32.mrf.mxu0
  %v5913 = vpop.f32.mrf.mxu0
  %v5914 = vadd.f32 %v5865, %v5913
  %v5915 = vpop.f32.mrf.mxu0
  %5916 = vdwg.mxu0
  %v5917 = vadd.f32 %v5661, %v5903
  %v5918 = vadd.f32 %v5664, %v5906
  %v5919 = vadd.f32 %v5669, %v5911
  %v5920 = vadd.f32 %v5672, %v5914
  %v5921 = vadd.f32 %v5917, 0.0
  %v5922 = vadd.f32 %v5918, 0.0
  %v5923 = vadd.f32 %v5919, 0.0
  %v5924 = vadd.f32 %v5920, 0.0
  %v5925 = vld [vmem:[#allocation2 + $0x18] sm:$0xff]
  %v5926 = vld [vmem:[#allocation2 + $0x20] sm:$0xff]
  %v5927 = vld [vmem:[#allocation2 + $0x28] sm:$0xff]
  %v5928 = vld [vmem:[#allocation2 + $0x30] sm:$0xff]
  %v5929 = vld [vmem:[#allocation2 + $0x38] sm:$0xff]
  %v5930 = vld [vmem:[#allocation2 + $0x40] sm:$0xff]
  %v5931 = vld [vmem:[#allocation2 + $0x48] sm:$0xff]
  %v5932 = vld [vmem:[#allocation2 + $0x50] sm:$0xff]
  %v5933 = vld [vmem:[#allocation2 + $0x58] sm:$0xff]
  %v5934 = vld [vmem:[#allocation2 + $0x60] sm:$0xff]
  %v5935 = vld [vmem:[#allocation2 + $0x68] sm:$0xff]
  %v5936 = vld [vmem:[#allocation2 + $0x70] sm:$0xff]
  %s5937 = scalar_lea.vmem %s5, 192
  %v5938 = vld [vmem:[%s5937] sm:$0xf]
  %v5939 = vld [vmem:[%s5937 + $0x4] sm:$0xf]
  %v5940 = vld [vmem:[%s5937 + $0x8] sm:$0xf]
  %v5941 = vld [vmem:[%s5937 + $0xc] sm:$0xf]
  %v5942 = vld [vmem:[%s5937 + $0x10] sm:$0xf]
  %v5943 = vld [vmem:[%s5937 + $0x14] sm:$0xf]
  %v5944 = vld [vmem:[%s5937 + $0x18] sm:$0xf]
  %v5945 = vld [vmem:[%s5937 + $0x1c] sm:$0xf]
  %v5946 = vld [vmem:[%s5937 + $0x20] sm:$0xf]
  %v5947 = vld [vmem:[%s5937 + $0x24] sm:$0xf]
  %v5948 = vld [vmem:[%s5937 + $0x28] sm:$0xf]
  %v5949 = vld [vmem:[%s5937 + $0x2c] sm:$0xf]
  %v5950 = vld [vmem:[%s5937 + $0x30] sm:$0xf]
  %v5951 = vld [vmem:[%s5937 + $0x34] sm:$0xf]
  %v5952 = vld [vmem:[%s5937 + $0x38] sm:$0xf]
  %v5953 = vld [vmem:[%s5937 + $0x3c] sm:$0xf]
  %v5954 = vld [vmem:[%s5937 + $0x40] sm:$0xf]
  %v5955 = vld [vmem:[%s5937 + $0x44] sm:$0xf]
  %v5956 = vld [vmem:[%s5937 + $0x48] sm:$0xf]
  %v5957 = vld [vmem:[%s5937 + $0x4c] sm:$0xf]
  %v5958 = vld [vmem:[%s5937 + $0x50] sm:$0xf]
  %v5959 = vld [vmem:[%s5937 + $0x54] sm:$0xf]
  %v5960 = vld [vmem:[%s5937 + $0x58] sm:$0xf]
  %v5961 = vld [vmem:[%s5937 + $0x5c] sm:$0xf]
  %v5962 = vld [vmem:[%s5937 + $0x60] sm:$0xf]
  %v5963 = vld [vmem:[%s5937 + $0x64] sm:$0xf]
  %v5964 = vld [vmem:[%s5937 + $0x68] sm:$0xf]
  %v5965 = vld [vmem:[%s5937 + $0x6c] sm:$0xf]
  %v5966 = vld [vmem:[%s5937 + $0x70] sm:$0xf]
  %v5967 = vld [vmem:[%s5937 + $0x74] sm:$0xf]
  %v5968 = vld [vmem:[%s5937 + $0x78] sm:$0xf]
  %v5969 = vld [vmem:[%s5937 + $0x7c] sm:$0xf]
  %v5970 = vld [vmem:[%s5937 + $0x80] sm:$0xf]
  %v5971 = vld [vmem:[%s5937 + $0x84] sm:$0xf]
  %v5972 = vld [vmem:[%s5937 + $0x88] sm:$0xf]
  %v5973 = vld [vmem:[%s5937 + $0x8c] sm:$0xf]
  %v5974 = vld [vmem:[%s5937 + $0x90] sm:$0xf]
  %v5975 = vld [vmem:[%s5937 + $0x94] sm:$0xf]
  %v5976 = vld [vmem:[%s5937 + $0x98] sm:$0xf]
  %v5977 = vld [vmem:[%s5937 + $0x9c] sm:$0xf]
  %v5978 = vld [vmem:[%s5937 + $0xa0] sm:$0xf]
  %v5979 = vld [vmem:[%s5937 + $0xa4] sm:$0xf]
  %v5980 = vld [vmem:[%s5937 + $0xa8] sm:$0xf]
  %v5981 = vld [vmem:[%s5937 + $0xac] sm:$0xf]
  %v5982 = vld [vmem:[%s5937 + $0xb0] sm:$0xf]
  %v5983 = vld [vmem:[%s5937 + $0xb4] sm:$0xf]
  %v5984 = vld [vmem:[%s5937 + $0xb8] sm:$0xf]
  %v5985 = vld [vmem:[%s5937 + $0xbc] sm:$0xf]
  %s5986 = scalar_lea.vmem %s6, 192
  %v5987 = vld [vmem:[%s5986] sm:$0xf]
  %v5988 = vld [vmem:[%s5986 + $0x4] sm:$0xf]
  %v5989 = vld [vmem:[%s5986 + $0x8] sm:$0xf]
  %v5990 = vld [vmem:[%s5986 + $0xc] sm:$0xf]
  %v5991 = vld [vmem:[%s5986 + $0x10] sm:$0xf]
  %v5992 = vld [vmem:[%s5986 + $0x14] sm:$0xf]
  %v5993 = vld [vmem:[%s5986 + $0x18] sm:$0xf]
  %v5994 = vld [vmem:[%s5986 + $0x1c] sm:$0xf]
  %v5995 = vld [vmem:[%s5986 + $0x20] sm:$0xf]
  %v5996 = vld [vmem:[%s5986 + $0x24] sm:$0xf]
  %v5997 = vld [vmem:[%s5986 + $0x28] sm:$0xf]
  %v5998 = vld [vmem:[%s5986 + $0x2c] sm:$0xf]
  %v5999 = vld [vmem:[%s5986 + $0x30] sm:$0xf]
  %v6000 = vld [vmem:[%s5986 + $0x34] sm:$0xf]
  %v6001 = vld [vmem:[%s5986 + $0x38] sm:$0xf]
  %v6002 = vld [vmem:[%s5986 + $0x3c] sm:$0xf]
  %v6003 = vld [vmem:[%s5986 + $0x40] sm:$0xf]
  %v6004 = vld [vmem:[%s5986 + $0x44] sm:$0xf]
  %v6005 = vld [vmem:[%s5986 + $0x48] sm:$0xf]
  %v6006 = vld [vmem:[%s5986 + $0x4c] sm:$0xf]
  %v6007 = vld [vmem:[%s5986 + $0x50] sm:$0xf]
  %v6008 = vld [vmem:[%s5986 + $0x54] sm:$0xf]
  %v6009 = vld [vmem:[%s5986 + $0x58] sm:$0xf]
  %v6010 = vld [vmem:[%s5986 + $0x5c] sm:$0xf]
  %v6011 = vld [vmem:[%s5986 + $0x60] sm:$0xf]
  %v6012 = vld [vmem:[%s5986 + $0x64] sm:$0xf]
  %v6013 = vld [vmem:[%s5986 + $0x68] sm:$0xf]
  %v6014 = vld [vmem:[%s5986 + $0x6c] sm:$0xf]
  %v6015 = vld [vmem:[%s5986 + $0x70] sm:$0xf]
  %v6016 = vld [vmem:[%s5986 + $0x74] sm:$0xf]
  %v6017 = vld [vmem:[%s5986 + $0x78] sm:$0xf]
  %v6018 = vld [vmem:[%s5986 + $0x7c] sm:$0xf]
  %v6019 = vld [vmem:[%s5986 + $0x80] sm:$0xf]
  %v6020 = vld [vmem:[%s5986 + $0x84] sm:$0xf]
  %v6021 = vld [vmem:[%s5986 + $0x88] sm:$0xf]
  %v6022 = vld [vmem:[%s5986 + $0x8c] sm:$0xf]
  %v6023 = vld [vmem:[%s5986 + $0x90] sm:$0xf]
  %v6024 = vld [vmem:[%s5986 + $0x94] sm:$0xf]
  %v6025 = vld [vmem:[%s5986 + $0x98] sm:$0xf]
  %v6026 = vld [vmem:[%s5986 + $0x9c] sm:$0xf]
  %v6027 = vld [vmem:[%s5986 + $0xa0] sm:$0xf]
  %v6028 = vld [vmem:[%s5986 + $0xa4] sm:$0xf]
  %v6029 = vld [vmem:[%s5986 + $0xa8] sm:$0xf]
  %v6030 = vld [vmem:[%s5986 + $0xac] sm:$0xf]
  %v6031 = vld [vmem:[%s5986 + $0xb0] sm:$0xf]
  %v6032 = vld [vmem:[%s5986 + $0xb4] sm:$0xf]
  %v6033 = vld [vmem:[%s5986 + $0xb8] sm:$0xf]
  %v6034 = vld [vmem:[%s5986 + $0xbc] sm:$0xf]
  %v6035 = vpack.c.bf16 %v5928, %v5925
  %v6036 = vpack.c.bf16 %v5929, %v5926
  %v6037 = vpack.c.bf16 %v5930, %v5927
  %v6038 = vpack.c.bf16 %v5934, %v5931
  %v6039 = vpack.c.bf16 %v5935, %v5932
  %v6040 = vpack.c.bf16 %v5936, %v5933
  %v6041 = vunpack.c.l.bf16 %v6035
  %v6042 = vunpack.c.l.bf16 %v6036
  %v6043 = vunpack.c.l.bf16 %v6037
  %v6044 = vunpack.c.h.bf16 %v6035
  %v6045 = vunpack.c.h.bf16 %v6036
  %v6046 = vunpack.c.h.bf16 %v6037
  %v6047 = vunpack.c.l.bf16 %v6038
  %v6048 = vunpack.c.l.bf16 %v6039
  %v6049 = vunpack.c.l.bf16 %v6040
  %v6050 = vunpack.c.h.bf16 %v6038
  %v6051 = vunpack.c.h.bf16 %v6039
  %v6052 = vunpack.c.h.bf16 %v6040
  %v6053 = vsub.f32 %v5925, %v6041
  %v6054 = vsub.f32 %v5926, %v6042
  %v6055 = vsub.f32 %v5927, %v6043
  %v6056 = vsub.f32 %v5928, %v6044
  %v6057 = vsub.f32 %v5929, %v6045
  %v6058 = vsub.f32 %v5930, %v6046
  %v6059 = vsub.f32 %v5931, %v6047
  %v6060 = vsub.f32 %v5932, %v6048
  %v6061 = vsub.f32 %v5933, %v6049
  %v6062 = vsub.f32 %v5934, %v6050
  %v6063 = vsub.f32 %v5935, %v6051
  %v6064 = vsub.f32 %v5936, %v6052
  %v6065 = vpack.c.bf16 %v6056, %v6053
  %v6066 = vpack.c.bf16 %v6057, %v6054
  %v6067 = vpack.c.bf16 %v6058, %v6055
  %v6068 = vpack.c.bf16 %v6062, %v6059
  %v6069 = vpack.c.bf16 %v6063, %v6060
  %v6070 = vpack.c.bf16 %v6064, %v6061
  %v6119 = vunpack.c.l.b16 %v5938
  %v6120 = vunpack.c.l.b16 %v5939
  %v6121 = vunpack.c.l.b16 %v5940
  %v6122 = vunpack.c.l.b16 %v5941
  %v6123 = vunpack.c.l.b16 %v5942
  %v6124 = vunpack.c.l.b16 %v5943
  %v6125 = vunpack.c.l.b16 %v5944
  %v6126 = vunpack.c.l.b16 %v5945
  %v6127 = vunpack.c.l.b16 %v5946
  %v6128 = vunpack.c.l.b16 %v5947
  %v6129 = vunpack.c.l.b16 %v5948
  %v6130 = vunpack.c.l.b16 %v5949
  %v6131 = vunpack.c.l.b16 %v5950
  %v6132 = vunpack.c.l.b16 %v5951
  %v6133 = vunpack.c.l.b16 %v5952
  %v6134 = vunpack.c.l.b16 %v5953
  %v6135 = vunpack.c.l.b16 %v5954
  %v6136 = vunpack.c.l.b16 %v5955
  %v6137 = vunpack.c.l.b16 %v5956
  %v6138 = vunpack.c.l.b16 %v5957
  %v6139 = vunpack.c.l.b16 %v5958
  %v6140 = vunpack.c.l.b16 %v5959
  %v6141 = vunpack.c.l.b16 %v5960
  %v6142 = vunpack.c.l.b16 %v5961
  %v6143 = vunpack.c.l.b16 %v5962
  %v6144 = vunpack.c.l.b16 %v5963
  %v6145 = vunpack.c.l.b16 %v5964
  %v6146 = vunpack.c.l.b16 %v5965
  %v6147 = vunpack.c.l.b16 %v5966
  %v6148 = vunpack.c.l.b16 %v5967
  %v6149 = vunpack.c.l.b16 %v5968
  %v6150 = vunpack.c.l.b16 %v5969
  %v6151 = vunpack.c.l.b16 %v5970
  %v6152 = vunpack.c.l.b16 %v5971
  %v6153 = vunpack.c.l.b16 %v5972
  %v6154 = vunpack.c.l.b16 %v5973
  %v6155 = vunpack.c.l.b16 %v5974
  %v6156 = vunpack.c.l.b16 %v5975
  %v6157 = vunpack.c.l.b16 %v5976
  %v6158 = vunpack.c.l.b16 %v5977
  %v6159 = vunpack.c.l.b16 %v5978
  %v6160 = vunpack.c.l.b16 %v5979
  %v6161 = vunpack.c.l.b16 %v5980
  %v6162 = vunpack.c.l.b16 %v5981
  %v6163 = vunpack.c.l.b16 %v5982
  %v6164 = vunpack.c.l.b16 %v5983
  %v6165 = vunpack.c.l.b16 %v5984
  %v6166 = vunpack.c.l.b16 %v5985
  %v6167 = vpack.c.b16 %v6120, %v6119
  %v6168 = vpack.c.b16 %v6122, %v6121
  %v6169 = vpack.c.b16 %v6124, %v6123
  %v6170 = vpack.c.b16 %v6126, %v6125
  %v6171 = vpack.c.b16 %v6128, %v6127
  %v6172 = vpack.c.b16 %v6130, %v6129
  %v6173 = vpack.c.b16 %v6132, %v6131
  %v6174 = vpack.c.b16 %v6134, %v6133
  %v6175 = vpack.c.b16 %v6136, %v6135
  %v6176 = vpack.c.b16 %v6138, %v6137
  %v6177 = vpack.c.b16 %v6140, %v6139
  %v6178 = vpack.c.b16 %v6142, %v6141
  %v6179 = vpack.c.b16 %v6144, %v6143
  %v6180 = vpack.c.b16 %v6146, %v6145
  %v6181 = vpack.c.b16 %v6148, %v6147
  %v6182 = vpack.c.b16 %v6150, %v6149
  %v6183 = vpack.c.b16 %v6152, %v6151
  %v6184 = vpack.c.b16 %v6154, %v6153
  %v6185 = vpack.c.b16 %v6156, %v6155
  %v6186 = vpack.c.b16 %v6158, %v6157
  %v6187 = vpack.c.b16 %v6160, %v6159
  %v6188 = vpack.c.b16 %v6162, %v6161
  %v6189 = vpack.c.b16 %v6164, %v6163
  %v6190 = vpack.c.b16 %v6166, %v6165
  %6215 = vmatprep.subr.bf16.mxu0 0
  %6216 = vmatpush1.bf16.msra.mxu0 %v6174
  %6217 = vmatprep.subr.bf16.mxu0 0
  %6218 = vmatpush1.bf16.msra.mxu0 %v6173
  %6219 = vmatprep.subr.bf16.mxu0 0
  %6220 = vmatpush1.bf16.msra.mxu0 %v6172
  %6221 = vmatprep.subr.bf16.mxu0 0
  %6222 = vmatpush1.bf16.msra.mxu0 %v6171
  %6223 = vmatprep.subr.bf16.mxu0 0
  %6224 = vmatpush1.bf16.msra.mxu0 %v6170
  %6225 = vmatprep.subr.bf16.mxu0 0
  %6226 = vmatpush1.bf16.msra.mxu0 %v6169
  %6227 = vmatprep.subr.bf16.mxu0 0
  %6228 = vmatpush1.bf16.msra.mxu0 %v6168
  %6229 = vmatprep.subr.bf16.mxu0 0
  %6230 = vmatpush1.bf16.msra.mxu0 %v6167
  %6231 = vmatprep.subr.bf16.mxu0 0
  %6232 = vmatpush2.bf16.msra.mxu0 %v6182
  %6233 = vmatprep.subr.bf16.mxu0 0
  %6234 = vmatpush2.bf16.msra.mxu0 %v6181
  %6235 = vmatprep.subr.bf16.mxu0 0
  %6236 = vmatpush2.bf16.msra.mxu0 %v6180
  %6237 = vmatprep.subr.bf16.mxu0 0
  %6238 = vmatpush2.bf16.msra.mxu0 %v6179
  %6239 = vmatprep.subr.bf16.mxu0 0
  %6240 = vmatpush2.bf16.msra.mxu0 %v6178
  %6241 = vmatprep.subr.bf16.mxu0 0
  %6242 = vmatpush2.bf16.msra.mxu0 %v6177
  %6243 = vmatprep.subr.bf16.mxu0 0
  %6244 = vmatpush2.bf16.msra.mxu0 %v6176
  %6245 = vmatprep.subr.bf16.mxu0 0
  %6246 = vmatpush2.bf16.msra.mxu0 %v6175
  %6247 = vmatprep.mubr.bf16.mxu0 %v6066
  %6248 = vmatmul.mubr.bf16.gmra.mxu0 %v6065
  %v6249 = vpop.f32.mrf.mxu0
  %v6250 = vadd.f32 0.0, %v6249
  %v6251 = vpop.f32.mrf.mxu0
  %v6252 = vpop.f32.mrf.mxu0
  %v6253 = vadd.f32 0.0, %v6252
  %v6254 = vpop.f32.mrf.mxu0
  %6255 = vmatprep.mubr.bf16.mxu0 %v6069
  %6256 = vmatmul.mubr.bf16.gmra.mxu0 %v6068
  %v6257 = vpop.f32.mrf.mxu0
  %v6258 = vadd.f32 0.0, %v6257
  %v6259 = vpop.f32.mrf.mxu0
  %v6260 = vpop.f32.mrf.mxu0
  %v6261 = vadd.f32 0.0, %v6260
  %v6262 = vpop.f32.mrf.mxu0
  %6263 = vdwg.mxu0
  %6264 = vmatprep.subr.bf16.mxu0 0
  %6265 = vmatpush1.bf16.msra.mxu0 %v6190
  %6266 = vmatprep.subr.bf16.mxu0 0
  %6267 = vmatpush1.bf16.msra.mxu0 %v6189
  %6268 = vmatprep.subr.bf16.mxu0 0
  %6269 = vmatpush1.bf16.msra.mxu0 %v6188
  %6270 = vmatprep.subr.bf16.mxu0 0
  %6271 = vmatpush1.bf16.msra.mxu0 %v6187
  %6272 = vmatprep.subr.bf16.mxu0 0
  %6273 = vmatpush1.bf16.msra.mxu0 %v6186
  %6274 = vmatprep.subr.bf16.mxu0 0
  %6275 = vmatpush1.bf16.msra.mxu0 %v6185
  %6276 = vmatprep.subr.bf16.mxu0 0
  %6277 = vmatpush1.bf16.msra.mxu0 %v6184
  %6278 = vmatprep.subr.bf16.mxu0 0
  %6279 = vmatpush1.bf16.msra.mxu0 %v6183
  %6280 = vmatprep.subr.bf16.mxu0 0
  %6281 = vmatpush2.bf16.msra.mxu0 0
  %6282 = vmatprep.subr.bf16.mxu0 0
  %6283 = vmatpush2.bf16.msra.mxu0 0
  %6284 = vmatprep.subr.bf16.mxu0 0
  %6285 = vmatpush2.bf16.msra.mxu0 0
  %6286 = vmatprep.subr.bf16.mxu0 0
  %6287 = vmatpush2.bf16.msra.mxu0 0
  %6288 = vmatprep.subr.bf16.mxu0 0
  %6289 = vmatpush2.bf16.msra.mxu0 0
  %6290 = vmatprep.subr.bf16.mxu0 0
  %6291 = vmatpush2.bf16.msra.mxu0 0
  %6292 = vmatprep.subr.bf16.mxu0 0
  %6293 = vmatpush2.bf16.msra.mxu0 0
  %6294 = vmatprep.subr.bf16.mxu0 0
  %6295 = vmatpush2.bf16.msra.mxu0 0
  %6296 = vmatprep.mubr.bf16.mxu0 0
  %6297 = vmatmul.mubr.bf16.gmra.mxu0 %v6067
  %v6298 = vpop.f32.mrf.mxu0
  %v6299 = vadd.f32 %v6250, %v6298
  %v6300 = vpop.f32.mrf.mxu0
  %v6301 = vpop.f32.mrf.mxu0
  %v6302 = vadd.f32 %v6253, %v6301
  %v6303 = vpop.f32.mrf.mxu0
  %6304 = vmatprep.mubr.bf16.mxu0 0
  %6305 = vmatmul.mubr.bf16.gmra.mxu0 %v6070
  %v6306 = vpop.f32.mrf.mxu0
  %v6307 = vadd.f32 %v6258, %v6306
  %v6308 = vpop.f32.mrf.mxu0
  %v6309 = vpop.f32.mrf.mxu0
  %v6310 = vadd.f32 %v6261, %v6309
  %v6311 = vpop.f32.mrf.mxu0
  %6312 = vdwg.mxu0
  %6313 = vmatprep.subr.bf16.mxu0 0
  %6314 = vmatpush1.bf16.msra.mxu0 %v6174
  %6315 = vmatprep.subr.bf16.mxu0 0
  %6316 = vmatpush1.bf16.msra.mxu0 %v6173
  %6317 = vmatprep.subr.bf16.mxu0 0
  %6318 = vmatpush1.bf16.msra.mxu0 %v6172
  %6319 = vmatprep.subr.bf16.mxu0 0
  %6320 = vmatpush1.bf16.msra.mxu0 %v6171
  %6321 = vmatprep.subr.bf16.mxu0 0
  %6322 = vmatpush1.bf16.msra.mxu0 %v6170
  %6323 = vmatprep.subr.bf16.mxu0 0
  %6324 = vmatpush1.bf16.msra.mxu0 %v6169
  %6325 = vmatprep.subr.bf16.mxu0 0
  %6326 = vmatpush1.bf16.msra.mxu0 %v6168
  %6327 = vmatprep.subr.bf16.mxu0 0
  %6328 = vmatpush1.bf16.msra.mxu0 %v6167
  %6329 = vmatprep.subr.bf16.mxu0 0
  %6330 = vmatpush2.bf16.msra.mxu0 %v6182
  %6331 = vmatprep.subr.bf16.mxu0 0
  %6332 = vmatpush2.bf16.msra.mxu0 %v6181
  %6333 = vmatprep.subr.bf16.mxu0 0
  %6334 = vmatpush2.bf16.msra.mxu0 %v6180
  %6335 = vmatprep.subr.bf16.mxu0 0
  %6336 = vmatpush2.bf16.msra.mxu0 %v6179
  %6337 = vmatprep.subr.bf16.mxu0 0
  %6338 = vmatpush2.bf16.msra.mxu0 %v6178
  %6339 = vmatprep.subr.bf16.mxu0 0
  %6340 = vmatpush2.bf16.msra.mxu0 %v6177
  %6341 = vmatprep.subr.bf16.mxu0 0
  %6342 = vmatpush2.bf16.msra.mxu0 %v6176
  %6343 = vmatprep.subr.bf16.mxu0 0
  %6344 = vmatpush2.bf16.msra.mxu0 %v6175
  %6345 = vmatprep.mubr.bf16.mxu0 %v6036
  %6346 = vmatmul.mubr.bf16.gmra.mxu0 %v6035
  %v6347 = vpop.f32.mrf.mxu0
  %v6348 = vadd.f32 %v6299, %v6347
  %v6349 = vpop.f32.mrf.mxu0
  %v6350 = vpop.f32.mrf.mxu0
  %v6351 = vadd.f32 %v6302, %v6350
  %v6352 = vpop.f32.mrf.mxu0
  %6353 = vmatprep.mubr.bf16.mxu0 %v6039
  %6354 = vmatmul.mubr.bf16.gmra.mxu0 %v6038
  %v6355 = vpop.f32.mrf.mxu0
  %v6356 = vadd.f32 %v6307, %v6355
  %v6357 = vpop.f32.mrf.mxu0
  %v6358 = vpop.f32.mrf.mxu0
  %v6359 = vadd.f32 %v6310, %v6358
  %v6360 = vpop.f32.mrf.mxu0
  %6361 = vdwg.mxu0
  %6362 = vmatprep.subr.bf16.mxu0 0
  %6363 = vmatpush1.bf16.msra.mxu0 %v6190
  %6364 = vmatprep.subr.bf16.mxu0 0
  %6365 = vmatpush1.bf16.msra.mxu0 %v6189
  %6366 = vmatprep.subr.bf16.mxu0 0
  %6367 = vmatpush1.bf16.msra.mxu0 %v6188
  %6368 = vmatprep.subr.bf16.mxu0 0
  %6369 = vmatpush1.bf16.msra.mxu0 %v6187
  %6370 = vmatprep.subr.bf16.mxu0 0
  %6371 = vmatpush1.bf16.msra.mxu0 %v6186
  %6372 = vmatprep.subr.bf16.mxu0 0
  %6373 = vmatpush1.bf16.msra.mxu0 %v6185
  %6374 = vmatprep.subr.bf16.mxu0 0
  %6375 = vmatpush1.bf16.msra.mxu0 %v6184
  %6376 = vmatprep.subr.bf16.mxu0 0
  %6377 = vmatpush1.bf16.msra.mxu0 %v6183
  %6378 = vmatprep.subr.bf16.mxu0 0
  %6379 = vmatpush2.bf16.msra.mxu0 0
  %6380 = vmatprep.subr.bf16.mxu0 0
  %6381 = vmatpush2.bf16.msra.mxu0 0
  %6382 = vmatprep.subr.bf16.mxu0 0
  %6383 = vmatpush2.bf16.msra.mxu0 0
  %6384 = vmatprep.subr.bf16.mxu0 0
  %6385 = vmatpush2.bf16.msra.mxu0 0
  %6386 = vmatprep.subr.bf16.mxu0 0
  %6387 = vmatpush2.bf16.msra.mxu0 0
  %6388 = vmatprep.subr.bf16.mxu0 0
  %6389 = vmatpush2.bf16.msra.mxu0 0
  %6390 = vmatprep.subr.bf16.mxu0 0
  %6391 = vmatpush2.bf16.msra.mxu0 0
  %6392 = vmatprep.subr.bf16.mxu0 0
  %6393 = vmatpush2.bf16.msra.mxu0 0
  %6394 = vmatprep.mubr.bf16.mxu0 0
  %6395 = vmatmul.mubr.bf16.gmra.mxu0 %v6037
  %v6396 = vpop.f32.mrf.mxu0
  %v6397 = vadd.f32 %v6348, %v6396
  %v6398 = vpop.f32.mrf.mxu0
  %v6399 = vpop.f32.mrf.mxu0
  %v6400 = vadd.f32 %v6351, %v6399
  %v6401 = vpop.f32.mrf.mxu0
  %6402 = vmatprep.mubr.bf16.mxu0 0
  %6403 = vmatmul.mubr.bf16.gmra.mxu0 %v6040
  %v6404 = vpop.f32.mrf.mxu0
  %v6405 = vadd.f32 %v6356, %v6404
  %v6406 = vpop.f32.mrf.mxu0
  %v6407 = vpop.f32.mrf.mxu0
  %v6408 = vadd.f32 %v6359, %v6407
  %v6409 = vpop.f32.mrf.mxu0
  %6410 = vdwg.mxu0
  %v6459 = vunpack.c.l.b16 %v5987
  %v6460 = vunpack.c.l.b16 %v5988
  %v6461 = vunpack.c.l.b16 %v5989
  %v6462 = vunpack.c.l.b16 %v5990
  %v6463 = vunpack.c.l.b16 %v5991
  %v6464 = vunpack.c.l.b16 %v5992
  %v6465 = vunpack.c.l.b16 %v5993
  %v6466 = vunpack.c.l.b16 %v5994
  %v6467 = vunpack.c.l.b16 %v5995
  %v6468 = vunpack.c.l.b16 %v5996
  %v6469 = vunpack.c.l.b16 %v5997
  %v6470 = vunpack.c.l.b16 %v5998
  %v6471 = vunpack.c.l.b16 %v5999
  %v6472 = vunpack.c.l.b16 %v6000
  %v6473 = vunpack.c.l.b16 %v6001
  %v6474 = vunpack.c.l.b16 %v6002
  %v6475 = vunpack.c.l.b16 %v6003
  %v6476 = vunpack.c.l.b16 %v6004
  %v6477 = vunpack.c.l.b16 %v6005
  %v6478 = vunpack.c.l.b16 %v6006
  %v6479 = vunpack.c.l.b16 %v6007
  %v6480 = vunpack.c.l.b16 %v6008
  %v6481 = vunpack.c.l.b16 %v6009
  %v6482 = vunpack.c.l.b16 %v6010
  %v6483 = vunpack.c.l.b16 %v6011
  %v6484 = vunpack.c.l.b16 %v6012
  %v6485 = vunpack.c.l.b16 %v6013
  %v6486 = vunpack.c.l.b16 %v6014
  %v6487 = vunpack.c.l.b16 %v6015
  %v6488 = vunpack.c.l.b16 %v6016
  %v6489 = vunpack.c.l.b16 %v6017
  %v6490 = vunpack.c.l.b16 %v6018
  %v6491 = vunpack.c.l.b16 %v6019
  %v6492 = vunpack.c.l.b16 %v6020
  %v6493 = vunpack.c.l.b16 %v6021
  %v6494 = vunpack.c.l.b16 %v6022
  %v6495 = vunpack.c.l.b16 %v6023
  %v6496 = vunpack.c.l.b16 %v6024
  %v6497 = vunpack.c.l.b16 %v6025
  %v6498 = vunpack.c.l.b16 %v6026
  %v6499 = vunpack.c.l.b16 %v6027
  %v6500 = vunpack.c.l.b16 %v6028
  %v6501 = vunpack.c.l.b16 %v6029
  %v6502 = vunpack.c.l.b16 %v6030
  %v6503 = vunpack.c.l.b16 %v6031
  %v6504 = vunpack.c.l.b16 %v6032
  %v6505 = vunpack.c.l.b16 %v6033
  %v6506 = vunpack.c.l.b16 %v6034
  %v6507 = vpack.c.b16 %v6460, %v6459
  %v6508 = vpack.c.b16 %v6462, %v6461
  %v6509 = vpack.c.b16 %v6464, %v6463
  %v6510 = vpack.c.b16 %v6466, %v6465
  %v6511 = vpack.c.b16 %v6468, %v6467
  %v6512 = vpack.c.b16 %v6470, %v6469
  %v6513 = vpack.c.b16 %v6472, %v6471
  %v6514 = vpack.c.b16 %v6474, %v6473
  %v6515 = vpack.c.b16 %v6476, %v6475
  %v6516 = vpack.c.b16 %v6478, %v6477
  %v6517 = vpack.c.b16 %v6480, %v6479
  %v6518 = vpack.c.b16 %v6482, %v6481
  %v6519 = vpack.c.b16 %v6484, %v6483
  %v6520 = vpack.c.b16 %v6486, %v6485
  %v6521 = vpack.c.b16 %v6488, %v6487
  %v6522 = vpack.c.b16 %v6490, %v6489
  %v6523 = vpack.c.b16 %v6492, %v6491
  %v6524 = vpack.c.b16 %v6494, %v6493
  %v6525 = vpack.c.b16 %v6496, %v6495
  %v6526 = vpack.c.b16 %v6498, %v6497
  %v6527 = vpack.c.b16 %v6500, %v6499
  %v6528 = vpack.c.b16 %v6502, %v6501
  %v6529 = vpack.c.b16 %v6504, %v6503
  %v6530 = vpack.c.b16 %v6506, %v6505
  %6555 = vmatprep.subr.bf16.mxu0 0
  %6556 = vmatpush1.bf16.msra.mxu0 %v6514
  %6557 = vmatprep.subr.bf16.mxu0 0
  %6558 = vmatpush1.bf16.msra.mxu0 %v6513
  %6559 = vmatprep.subr.bf16.mxu0 0
  %6560 = vmatpush1.bf16.msra.mxu0 %v6512
  %6561 = vmatprep.subr.bf16.mxu0 0
  %6562 = vmatpush1.bf16.msra.mxu0 %v6511
  %6563 = vmatprep.subr.bf16.mxu0 0
  %6564 = vmatpush1.bf16.msra.mxu0 %v6510
  %6565 = vmatprep.subr.bf16.mxu0 0
  %6566 = vmatpush1.bf16.msra.mxu0 %v6509
  %6567 = vmatprep.subr.bf16.mxu0 0
  %6568 = vmatpush1.bf16.msra.mxu0 %v6508
  %6569 = vmatprep.subr.bf16.mxu0 0
  %6570 = vmatpush1.bf16.msra.mxu0 %v6507
  %6571 = vmatprep.subr.bf16.mxu0 0
  %6572 = vmatpush2.bf16.msra.mxu0 %v6522
  %6573 = vmatprep.subr.bf16.mxu0 0
  %6574 = vmatpush2.bf16.msra.mxu0 %v6521
  %6575 = vmatprep.subr.bf16.mxu0 0
  %6576 = vmatpush2.bf16.msra.mxu0 %v6520
  %6577 = vmatprep.subr.bf16.mxu0 0
  %6578 = vmatpush2.bf16.msra.mxu0 %v6519
  %6579 = vmatprep.subr.bf16.mxu0 0
  %6580 = vmatpush2.bf16.msra.mxu0 %v6518
  %6581 = vmatprep.subr.bf16.mxu0 0
  %6582 = vmatpush2.bf16.msra.mxu0 %v6517
  %6583 = vmatprep.subr.bf16.mxu0 0
  %6584 = vmatpush2.bf16.msra.mxu0 %v6516
  %6585 = vmatprep.subr.bf16.mxu0 0
  %6586 = vmatpush2.bf16.msra.mxu0 %v6515
  %6587 = vmatprep.mubr.bf16.mxu0 %v6036
  %6588 = vmatmul.mubr.bf16.gmra.mxu0 %v6035
  %v6589 = vpop.f32.mrf.mxu0
  %v6590 = vadd.f32 0.0, %v6589
  %v6591 = vpop.f32.mrf.mxu0
  %v6592 = vpop.f32.mrf.mxu0
  %v6593 = vadd.f32 0.0, %v6592
  %v6594 = vpop.f32.mrf.mxu0
  %6595 = vmatprep.mubr.bf16.mxu0 %v6039
  %6596 = vmatmul.mubr.bf16.gmra.mxu0 %v6038
  %v6597 = vpop.f32.mrf.mxu0
  %v6598 = vadd.f32 0.0, %v6597
  %v6599 = vpop.f32.mrf.mxu0
  %v6600 = vpop.f32.mrf.mxu0
  %v6601 = vadd.f32 0.0, %v6600
  %v6602 = vpop.f32.mrf.mxu0
  %6603 = vdwg.mxu0
  %6604 = vmatprep.subr.bf16.mxu0 0
  %6605 = vmatpush1.bf16.msra.mxu0 %v6530
  %6606 = vmatprep.subr.bf16.mxu0 0
  %6607 = vmatpush1.bf16.msra.mxu0 %v6529
  %6608 = vmatprep.subr.bf16.mxu0 0
  %6609 = vmatpush1.bf16.msra.mxu0 %v6528
  %6610 = vmatprep.subr.bf16.mxu0 0
  %6611 = vmatpush1.bf16.msra.mxu0 %v6527
  %6612 = vmatprep.subr.bf16.mxu0 0
  %6613 = vmatpush1.bf16.msra.mxu0 %v6526
  %6614 = vmatprep.subr.bf16.mxu0 0
  %6615 = vmatpush1.bf16.msra.mxu0 %v6525
  %6616 = vmatprep.subr.bf16.mxu0 0
  %6617 = vmatpush1.bf16.msra.mxu0 %v6524
  %6618 = vmatprep.subr.bf16.mxu0 0
  %6619 = vmatpush1.bf16.msra.mxu0 %v6523
  %6620 = vmatprep.subr.bf16.mxu0 0
  %6621 = vmatpush2.bf16.msra.mxu0 0
  %6622 = vmatprep.subr.bf16.mxu0 0
  %6623 = vmatpush2.bf16.msra.mxu0 0
  %6624 = vmatprep.subr.bf16.mxu0 0
  %6625 = vmatpush2.bf16.msra.mxu0 0
  %6626 = vmatprep.subr.bf16.mxu0 0
  %6627 = vmatpush2.bf16.msra.mxu0 0
  %6628 = vmatprep.subr.bf16.mxu0 0
  %6629 = vmatpush2.bf16.msra.mxu0 0
  %6630 = vmatprep.subr.bf16.mxu0 0
  %6631 = vmatpush2.bf16.msra.mxu0 0
  %6632 = vmatprep.subr.bf16.mxu0 0
  %6633 = vmatpush2.bf16.msra.mxu0 0
  %6634 = vmatprep.subr.bf16.mxu0 0
  %6635 = vmatpush2.bf16.msra.mxu0 0
  %6636 = vmatprep.mubr.bf16.mxu0 0
  %6637 = vmatmul.mubr.bf16.gmra.mxu0 %v6037
  %v6638 = vpop.f32.mrf.mxu0
  %v6639 = vadd.f32 %v6590, %v6638
  %v6640 = vpop.f32.mrf.mxu0
  %v6641 = vpop.f32.mrf.mxu0
  %v6642 = vadd.f32 %v6593, %v6641
  %v6643 = vpop.f32.mrf.mxu0
  %6644 = vmatprep.mubr.bf16.mxu0 0
  %6645 = vmatmul.mubr.bf16.gmra.mxu0 %v6040
  %v6646 = vpop.f32.mrf.mxu0
  %v6647 = vadd.f32 %v6598, %v6646
  %v6648 = vpop.f32.mrf.mxu0
  %v6649 = vpop.f32.mrf.mxu0
  %v6650 = vadd.f32 %v6601, %v6649
  %v6651 = vpop.f32.mrf.mxu0
  %6652 = vdwg.mxu0
  %v6653 = vadd.f32 %v6397, %v6639
  %v6654 = vadd.f32 %v6400, %v6642
  %v6655 = vadd.f32 %v6405, %v6647
  %v6656 = vadd.f32 %v6408, %v6650
  %v6657 = vadd.f32 %v5921, %v6653
  %v6658 = vadd.f32 %v5922, %v6654
  %v6659 = vadd.f32 %v5923, %v6655
  %v6660 = vadd.f32 %v5924, %v6656
  %v6661 = vld [vmem:[#allocation2 + $0x30] sm:$0xff]
  %v6662 = vld [vmem:[#allocation2 + $0x38] sm:$0xff]
  %v6663 = vld [vmem:[#allocation2 + $0x40] sm:$0xff]
  %v6664 = vld [vmem:[#allocation2 + $0x48] sm:$0xff]
  %v6665 = vld [vmem:[#allocation2 + $0x50] sm:$0xff]
  %v6666 = vld [vmem:[#allocation2 + $0x58] sm:$0xff]
  %v6667 = vld [vmem:[#allocation2 + $0x60] sm:$0xff]
  %v6668 = vld [vmem:[#allocation2 + $0x68] sm:$0xff]
  %v6669 = vld [vmem:[#allocation2 + $0x70] sm:$0xff]
  %v6670 = vld [vmem:[#allocation2 + $0x78] sm:$0xff]
  %v6671 = vld [vmem:[#allocation2 + $0x80] sm:$0xff]
  %v6672 = vld [vmem:[#allocation2 + $0x88] sm:$0xff]
  %s6673 = scalar_lea.vmem %s5, 384
  %v6674 = vld [vmem:[%s6673] sm:$0xf]
  %v6675 = vld [vmem:[%s6673 + $0x4] sm:$0xf]
  %v6676 = vld [vmem:[%s6673 + $0x8] sm:$0xf]
  %v6677 = vld [vmem:[%s6673 + $0xc] sm:$0xf]
  %v6678 = vld [vmem:[%s6673 + $0x10] sm:$0xf]
  %v6679 = vld [vmem:[%s6673 + $0x14] sm:$0xf]
  %v6680 = vld [vmem:[%s6673 + $0x18] sm:$0xf]
  %v6681 = vld [vmem:[%s6673 + $0x1c] sm:$0xf]
  %v6682 = vld [vmem:[%s6673 + $0x20] sm:$0xf]
  %v6683 = vld [vmem:[%s6673 + $0x24] sm:$0xf]
  %v6684 = vld [vmem:[%s6673 + $0x28] sm:$0xf]
  %v6685 = vld [vmem:[%s6673 + $0x2c] sm:$0xf]
  %v6686 = vld [vmem:[%s6673 + $0x30] sm:$0xf]
  %v6687 = vld [vmem:[%s6673 + $0x34] sm:$0xf]
  %v6688 = vld [vmem:[%s6673 + $0x38] sm:$0xf]
  %v6689 = vld [vmem:[%s6673 + $0x3c] sm:$0xf]
  %v6690 = vld [vmem:[%s6673 + $0x40] sm:$0xf]
  %v6691 = vld [vmem:[%s6673 + $0x44] sm:$0xf]
  %v6692 = vld [vmem:[%s6673 + $0x48] sm:$0xf]
  %v6693 = vld [vmem:[%s6673 + $0x4c] sm:$0xf]
  %v6694 = vld [vmem:[%s6673 + $0x50] sm:$0xf]
  %v6695 = vld [vmem:[%s6673 + $0x54] sm:$0xf]
  %v6696 = vld [vmem:[%s6673 + $0x58] sm:$0xf]
  %v6697 = vld [vmem:[%s6673 + $0x5c] sm:$0xf]
  %v6698 = vld [vmem:[%s6673 + $0x60] sm:$0xf]
  %v6699 = vld [vmem:[%s6673 + $0x64] sm:$0xf]
  %v6700 = vld [vmem:[%s6673 + $0x68] sm:$0xf]
  %v6701 = vld [vmem:[%s6673 + $0x6c] sm:$0xf]
  %v6702 = vld [vmem:[%s6673 + $0x70] sm:$0xf]
  %v6703 = vld [vmem:[%s6673 + $0x74] sm:$0xf]
  %v6704 = vld [vmem:[%s6673 + $0x78] sm:$0xf]
  %v6705 = vld [vmem:[%s6673 + $0x7c] sm:$0xf]
  %v6706 = vld [vmem:[%s6673 + $0x80] sm:$0xf]
  %v6707 = vld [vmem:[%s6673 + $0x84] sm:$0xf]
  %v6708 = vld [vmem:[%s6673 + $0x88] sm:$0xf]
  %v6709 = vld [vmem:[%s6673 + $0x8c] sm:$0xf]
  %v6710 = vld [vmem:[%s6673 + $0x90] sm:$0xf]
  %v6711 = vld [vmem:[%s6673 + $0x94] sm:$0xf]
  %v6712 = vld [vmem:[%s6673 + $0x98] sm:$0xf]
  %v6713 = vld [vmem:[%s6673 + $0x9c] sm:$0xf]
  %v6714 = vld [vmem:[%s6673 + $0xa0] sm:$0xf]
  %v6715 = vld [vmem:[%s6673 + $0xa4] sm:$0xf]
  %v6716 = vld [vmem:[%s6673 + $0xa8] sm:$0xf]
  %v6717 = vld [vmem:[%s6673 + $0xac] sm:$0xf]
  %v6718 = vld [vmem:[%s6673 + $0xb0] sm:$0xf]
  %v6719 = vld [vmem:[%s6673 + $0xb4] sm:$0xf]
  %v6720 = vld [vmem:[%s6673 + $0xb8] sm:$0xf]
  %v6721 = vld [vmem:[%s6673 + $0xbc] sm:$0xf]
  %s6722 = scalar_lea.vmem %s6, 384
  %v6723 = vld [vmem:[%s6722] sm:$0xf]
  %v6724 = vld [vmem:[%s6722 + $0x4] sm:$0xf]
  %v6725 = vld [vmem:[%s6722 + $0x8] sm:$0xf]
  %v6726 = vld [vmem:[%s6722 + $0xc] sm:$0xf]
  %v6727 = vld [vmem:[%s6722 + $0x10] sm:$0xf]
  %v6728 = vld [vmem:[%s6722 + $0x14] sm:$0xf]
  %v6729 = vld [vmem:[%s6722 + $0x18] sm:$0xf]
  %v6730 = vld [vmem:[%s6722 + $0x1c] sm:$0xf]
  %v6731 = vld [vmem:[%s6722 + $0x20] sm:$0xf]
  %v6732 = vld [vmem:[%s6722 + $0x24] sm:$0xf]
  %v6733 = vld [vmem:[%s6722 + $0x28] sm:$0xf]
  %v6734 = vld [vmem:[%s6722 + $0x2c] sm:$0xf]
  %v6735 = vld [vmem:[%s6722 + $0x30] sm:$0xf]
  %v6736 = vld [vmem:[%s6722 + $0x34] sm:$0xf]
  %v6737 = vld [vmem:[%s6722 + $0x38] sm:$0xf]
  %v6738 = vld [vmem:[%s6722 + $0x3c] sm:$0xf]
  %v6739 = vld [vmem:[%s6722 + $0x40] sm:$0xf]
  %v6740 = vld [vmem:[%s6722 + $0x44] sm:$0xf]
  %v6741 = vld [vmem:[%s6722 + $0x48] sm:$0xf]
  %v6742 = vld [vmem:[%s6722 + $0x4c] sm:$0xf]
  %v6743 = vld [vmem:[%s6722 + $0x50] sm:$0xf]
  %v6744 = vld [vmem:[%s6722 + $0x54] sm:$0xf]
  %v6745 = vld [vmem:[%s6722 + $0x58] sm:$0xf]
  %v6746 = vld [vmem:[%s6722 + $0x5c] sm:$0xf]
  %v6747 = vld [vmem:[%s6722 + $0x60] sm:$0xf]
  %v6748 = vld [vmem:[%s6722 + $0x64] sm:$0xf]
  %v6749 = vld [vmem:[%s6722 + $0x68] sm:$0xf]
  %v6750 = vld [vmem:[%s6722 + $0x6c] sm:$0xf]
  %v6751 = vld [vmem:[%s6722 + $0x70] sm:$0xf]
  %v6752 = vld [vmem:[%s6722 + $0x74] sm:$0xf]
  %v6753 = vld [vmem:[%s6722 + $0x78] sm:$0xf]
  %v6754 = vld [vmem:[%s6722 + $0x7c] sm:$0xf]
  %v6755 = vld [vmem:[%s6722 + $0x80] sm:$0xf]
  %v6756 = vld [vmem:[%s6722 + $0x84] sm:$0xf]
  %v6757 = vld [vmem:[%s6722 + $0x88] sm:$0xf]
  %v6758 = vld [vmem:[%s6722 + $0x8c] sm:$0xf]
  %v6759 = vld [vmem:[%s6722 + $0x90] sm:$0xf]
  %v6760 = vld [vmem:[%s6722 + $0x94] sm:$0xf]
  %v6761 = vld [vmem:[%s6722 + $0x98] sm:$0xf]
  %v6762 = vld [vmem:[%s6722 + $0x9c] sm:$0xf]
  %v6763 = vld [vmem:[%s6722 + $0xa0] sm:$0xf]
  %v6764 = vld [vmem:[%s6722 + $0xa4] sm:$0xf]
  %v6765 = vld [vmem:[%s6722 + $0xa8] sm:$0xf]
  %v6766 = vld [vmem:[%s6722 + $0xac] sm:$0xf]
  %v6767 = vld [vmem:[%s6722 + $0xb0] sm:$0xf]
  %v6768 = vld [vmem:[%s6722 + $0xb4] sm:$0xf]
  %v6769 = vld [vmem:[%s6722 + $0xb8] sm:$0xf]
  %v6770 = vld [vmem:[%s6722 + $0xbc] sm:$0xf]
  %v6771 = vpack.c.bf16 %v6664, %v6661
  %v6772 = vpack.c.bf16 %v6665, %v6662
  %v6773 = vpack.c.bf16 %v6666, %v6663
  %v6774 = vpack.c.bf16 %v6670, %v6667
  %v6775 = vpack.c.bf16 %v6671, %v6668
  %v6776 = vpack.c.bf16 %v6672, %v6669
  %v6777 = vunpack.c.l.bf16 %v6771
  %v6778 = vunpack.c.l.bf16 %v6772
  %v6779 = vunpack.c.l.bf16 %v6773
  %v6780 = vunpack.c.h.bf16 %v6771
  %v6781 = vunpack.c.h.bf16 %v6772
  %v6782 = vunpack.c.h.bf16 %v6773
  %v6783 = vunpack.c.l.bf16 %v6774
  %v6784 = vunpack.c.l.bf16 %v6775
  %v6785 = vunpack.c.l.bf16 %v6776
  %v6786 = vunpack.c.h.bf16 %v6774
  %v6787 = vunpack.c.h.bf16 %v6775
  %v6788 = vunpack.c.h.bf16 %v6776
  %v6789 = vsub.f32 %v6661, %v6777
  %v6790 = vsub.f32 %v6662, %v6778
  %v6791 = vsub.f32 %v6663, %v6779
  %v6792 = vsub.f32 %v6664, %v6780
  %v6793 = vsub.f32 %v6665, %v6781
  %v6794 = vsub.f32 %v6666, %v6782
  %v6795 = vsub.f32 %v6667, %v6783
  %v6796 = vsub.f32 %v6668, %v6784
  %v6797 = vsub.f32 %v6669, %v6785
  %v6798 = vsub.f32 %v6670, %v6786
  %v6799 = vsub.f32 %v6671, %v6787
  %v6800 = vsub.f32 %v6672, %v6788
  %v6801 = vpack.c.bf16 %v6792, %v6789
  %v6802 = vpack.c.bf16 %v6793, %v6790
  %v6803 = vpack.c.bf16 %v6794, %v6791
  %v6804 = vpack.c.bf16 %v6798, %v6795
  %v6805 = vpack.c.bf16 %v6799, %v6796
  %v6806 = vpack.c.bf16 %v6800, %v6797
  %v6855 = vunpack.c.l.b16 %v6674
  %v6856 = vunpack.c.l.b16 %v6675
  %v6857 = vunpack.c.l.b16 %v6676
  %v6858 = vunpack.c.l.b16 %v6677
  %v6859 = vunpack.c.l.b16 %v6678
  %v6860 = vunpack.c.l.b16 %v6679
  %v6861 = vunpack.c.l.b16 %v6680
  %v6862 = vunpack.c.l.b16 %v6681
  %v6863 = vunpack.c.l.b16 %v6682
  %v6864 = vunpack.c.l.b16 %v6683
  %v6865 = vunpack.c.l.b16 %v6684
  %v6866 = vunpack.c.l.b16 %v6685
  %v6867 = vunpack.c.l.b16 %v6686
  %v6868 = vunpack.c.l.b16 %v6687
  %v6869 = vunpack.c.l.b16 %v6688
  %v6870 = vunpack.c.l.b16 %v6689
  %v6871 = vunpack.c.l.b16 %v6690
  %v6872 = vunpack.c.l.b16 %v6691
  %v6873 = vunpack.c.l.b16 %v6692
  %v6874 = vunpack.c.l.b16 %v6693
  %v6875 = vunpack.c.l.b16 %v6694
  %v6876 = vunpack.c.l.b16 %v6695
  %v6877 = vunpack.c.l.b16 %v6696
  %v6878 = vunpack.c.l.b16 %v6697
  %v6879 = vunpack.c.l.b16 %v6698
  %v6880 = vunpack.c.l.b16 %v6699
  %v6881 = vunpack.c.l.b16 %v6700
  %v6882 = vunpack.c.l.b16 %v6701
  %v6883 = vunpack.c.l.b16 %v6702
  %v6884 = vunpack.c.l.b16 %v6703
  %v6885 = vunpack.c.l.b16 %v6704
  %v6886 = vunpack.c.l.b16 %v6705
  %v6887 = vunpack.c.l.b16 %v6706
  %v6888 = vunpack.c.l.b16 %v6707
  %v6889 = vunpack.c.l.b16 %v6708
  %v6890 = vunpack.c.l.b16 %v6709
  %v6891 = vunpack.c.l.b16 %v6710
  %v6892 = vunpack.c.l.b16 %v6711
  %v6893 = vunpack.c.l.b16 %v6712
  %v6894 = vunpack.c.l.b16 %v6713
  %v6895 = vunpack.c.l.b16 %v6714
  %v6896 = vunpack.c.l.b16 %v6715
  %v6897 = vunpack.c.l.b16 %v6716
  %v6898 = vunpack.c.l.b16 %v6717
  %v6899 = vunpack.c.l.b16 %v6718
  %v6900 = vunpack.c.l.b16 %v6719
  %v6901 = vunpack.c.l.b16 %v6720
  %v6902 = vunpack.c.l.b16 %v6721
  %v6903 = vpack.c.b16 %v6856, %v6855
  %v6904 = vpack.c.b16 %v6858, %v6857
  %v6905 = vpack.c.b16 %v6860, %v6859
  %v6906 = vpack.c.b16 %v6862, %v6861
  %v6907 = vpack.c.b16 %v6864, %v6863
  %v6908 = vpack.c.b16 %v6866, %v6865
  %v6909 = vpack.c.b16 %v6868, %v6867
  %v6910 = vpack.c.b16 %v6870, %v6869
  %v6911 = vpack.c.b16 %v6872, %v6871
  %v6912 = vpack.c.b16 %v6874, %v6873
  %v6913 = vpack.c.b16 %v6876, %v6875
  %v6914 = vpack.c.b16 %v6878, %v6877
  %v6915 = vpack.c.b16 %v6880, %v6879
  %v6916 = vpack.c.b16 %v6882, %v6881
  %v6917 = vpack.c.b16 %v6884, %v6883
  %v6918 = vpack.c.b16 %v6886, %v6885
  %v6919 = vpack.c.b16 %v6888, %v6887
  %v6920 = vpack.c.b16 %v6890, %v6889
  %v6921 = vpack.c.b16 %v6892, %v6891
  %v6922 = vpack.c.b16 %v6894, %v6893
  %v6923 = vpack.c.b16 %v6896, %v6895
  %v6924 = vpack.c.b16 %v6898, %v6897
  %v6925 = vpack.c.b16 %v6900, %v6899
  %v6926 = vpack.c.b16 %v6902, %v6901
  %6951 = vmatprep.subr.bf16.mxu0 0
  %6952 = vmatpush1.bf16.msra.mxu0 %v6910
  %6953 = vmatprep.subr.bf16.mxu0 0
  %6954 = vmatpush1.bf16.msra.mxu0 %v6909
  %6955 = vmatprep.subr.bf16.mxu0 0
  %6956 = vmatpush1.bf16.msra.mxu0 %v6908
  %6957 = vmatprep.subr.bf16.mxu0 0
  %6958 = vmatpush1.bf16.msra.mxu0 %v6907
  %6959 = vmatprep.subr.bf16.mxu0 0
  %6960 = vmatpush1.bf16.msra.mxu0 %v6906
  %6961 = vmatprep.subr.bf16.mxu0 0
  %6962 = vmatpush1.bf16.msra.mxu0 %v6905
  %6963 = vmatprep.subr.bf16.mxu0 0
  %6964 = vmatpush1.bf16.msra.mxu0 %v6904
  %6965 = vmatprep.subr.bf16.mxu0 0
  %6966 = vmatpush1.bf16.msra.mxu0 %v6903
  %6967 = vmatprep.subr.bf16.mxu0 0
  %6968 = vmatpush2.bf16.msra.mxu0 %v6918
  %6969 = vmatprep.subr.bf16.mxu0 0
  %6970 = vmatpush2.bf16.msra.mxu0 %v6917
  %6971 = vmatprep.subr.bf16.mxu0 0
  %6972 = vmatpush2.bf16.msra.mxu0 %v6916
  %6973 = vmatprep.subr.bf16.mxu0 0
  %6974 = vmatpush2.bf16.msra.mxu0 %v6915
  %6975 = vmatprep.subr.bf16.mxu0 0
  %6976 = vmatpush2.bf16.msra.mxu0 %v6914
  %6977 = vmatprep.subr.bf16.mxu0 0
  %6978 = vmatpush2.bf16.msra.mxu0 %v6913
  %6979 = vmatprep.subr.bf16.mxu0 0
  %6980 = vmatpush2.bf16.msra.mxu0 %v6912
  %6981 = vmatprep.subr.bf16.mxu0 0
  %6982 = vmatpush2.bf16.msra.mxu0 %v6911
  %6983 = vmatprep.mubr.bf16.mxu0 %v6802
  %6984 = vmatmul.mubr.bf16.gmra.mxu0 %v6801
  %v6985 = vpop.f32.mrf.mxu0
  %v6986 = vadd.f32 0.0, %v6985
  %v6987 = vpop.f32.mrf.mxu0
  %v6988 = vpop.f32.mrf.mxu0
  %v6989 = vadd.f32 0.0, %v6988
  %v6990 = vpop.f32.mrf.mxu0
  %6991 = vmatprep.mubr.bf16.mxu0 %v6805
  %6992 = vmatmul.mubr.bf16.gmra.mxu0 %v6804
  %v6993 = vpop.f32.mrf.mxu0
  %v6994 = vadd.f32 0.0, %v6993
  %v6995 = vpop.f32.mrf.mxu0
  %v6996 = vpop.f32.mrf.mxu0
  %v6997 = vadd.f32 0.0, %v6996
  %v6998 = vpop.f32.mrf.mxu0
  %6999 = vdwg.mxu0
  %7000 = vmatprep.subr.bf16.mxu0 0
  %7001 = vmatpush1.bf16.msra.mxu0 %v6926
  %7002 = vmatprep.subr.bf16.mxu0 0
  %7003 = vmatpush1.bf16.msra.mxu0 %v6925
  %7004 = vmatprep.subr.bf16.mxu0 0
  %7005 = vmatpush1.bf16.msra.mxu0 %v6924
  %7006 = vmatprep.subr.bf16.mxu0 0
  %7007 = vmatpush1.bf16.msra.mxu0 %v6923
  %7008 = vmatprep.subr.bf16.mxu0 0
  %7009 = vmatpush1.bf16.msra.mxu0 %v6922
  %7010 = vmatprep.subr.bf16.mxu0 0
  %7011 = vmatpush1.bf16.msra.mxu0 %v6921
  %7012 = vmatprep.subr.bf16.mxu0 0
  %7013 = vmatpush1.bf16.msra.mxu0 %v6920
  %7014 = vmatprep.subr.bf16.mxu0 0
  %7015 = vmatpush1.bf16.msra.mxu0 %v6919
  %7016 = vmatprep.subr.bf16.mxu0 0
  %7017 = vmatpush2.bf16.msra.mxu0 0
  %7018 = vmatprep.subr.bf16.mxu0 0
  %7019 = vmatpush2.bf16.msra.mxu0 0
  %7020 = vmatprep.subr.bf16.mxu0 0
  %7021 = vmatpush2.bf16.msra.mxu0 0
  %7022 = vmatprep.subr.bf16.mxu0 0
  %7023 = vmatpush2.bf16.msra.mxu0 0
  %7024 = vmatprep.subr.bf16.mxu0 0
  %7025 = vmatpush2.bf16.msra.mxu0 0
  %7026 = vmatprep.subr.bf16.mxu0 0
  %7027 = vmatpush2.bf16.msra.mxu0 0
  %7028 = vmatprep.subr.bf16.mxu0 0
  %7029 = vmatpush2.bf16.msra.mxu0 0
  %7030 = vmatprep.subr.bf16.mxu0 0
  %7031 = vmatpush2.bf16.msra.mxu0 0
  %7032 = vmatprep.mubr.bf16.mxu0 0
  %7033 = vmatmul.mubr.bf16.gmra.mxu0 %v6803
  %v7034 = vpop.f32.mrf.mxu0
  %v7035 = vadd.f32 %v6986, %v7034
  %v7036 = vpop.f32.mrf.mxu0
  %v7037 = vpop.f32.mrf.mxu0
  %v7038 = vadd.f32 %v6989, %v7037
  %v7039 = vpop.f32.mrf.mxu0
  %7040 = vmatprep.mubr.bf16.mxu0 0
  %7041 = vmatmul.mubr.bf16.gmra.mxu0 %v6806
  %v7042 = vpop.f32.mrf.mxu0
  %v7043 = vadd.f32 %v6994, %v7042
  %v7044 = vpop.f32.mrf.mxu0
  %v7045 = vpop.f32.mrf.mxu0
  %v7046 = vadd.f32 %v6997, %v7045
  %v7047 = vpop.f32.mrf.mxu0
  %7048 = vdwg.mxu0
  %7049 = vmatprep.subr.bf16.mxu0 0
  %7050 = vmatpush1.bf16.msra.mxu0 %v6910
  %7051 = vmatprep.subr.bf16.mxu0 0
  %7052 = vmatpush1.bf16.msra.mxu0 %v6909
  %7053 = vmatprep.subr.bf16.mxu0 0
  %7054 = vmatpush1.bf16.msra.mxu0 %v6908
  %7055 = vmatprep.subr.bf16.mxu0 0
  %7056 = vmatpush1.bf16.msra.mxu0 %v6907
  %7057 = vmatprep.subr.bf16.mxu0 0
  %7058 = vmatpush1.bf16.msra.mxu0 %v6906
  %7059 = vmatprep.subr.bf16.mxu0 0
  %7060 = vmatpush1.bf16.msra.mxu0 %v6905
  %7061 = vmatprep.subr.bf16.mxu0 0
  %7062 = vmatpush1.bf16.msra.mxu0 %v6904
  %7063 = vmatprep.subr.bf16.mxu0 0
  %7064 = vmatpush1.bf16.msra.mxu0 %v6903
  %7065 = vmatprep.subr.bf16.mxu0 0
  %7066 = vmatpush2.bf16.msra.mxu0 %v6918
  %7067 = vmatprep.subr.bf16.mxu0 0
  %7068 = vmatpush2.bf16.msra.mxu0 %v6917
  %7069 = vmatprep.subr.bf16.mxu0 0
  %7070 = vmatpush2.bf16.msra.mxu0 %v6916
  %7071 = vmatprep.subr.bf16.mxu0 0
  %7072 = vmatpush2.bf16.msra.mxu0 %v6915
  %7073 = vmatprep.subr.bf16.mxu0 0
  %7074 = vmatpush2.bf16.msra.mxu0 %v6914
  %7075 = vmatprep.subr.bf16.mxu0 0
  %7076 = vmatpush2.bf16.msra.mxu0 %v6913
  %7077 = vmatprep.subr.bf16.mxu0 0
  %7078 = vmatpush2.bf16.msra.mxu0 %v6912
  %7079 = vmatprep.subr.bf16.mxu0 0
  %7080 = vmatpush2.bf16.msra.mxu0 %v6911
  %7081 = vmatprep.mubr.bf16.mxu0 %v6772
  %7082 = vmatmul.mubr.bf16.gmra.mxu0 %v6771
  %v7083 = vpop.f32.mrf.mxu0
  %v7084 = vadd.f32 %v7035, %v7083
  %v7085 = vpop.f32.mrf.mxu0
  %v7086 = vpop.f32.mrf.mxu0
  %v7087 = vadd.f32 %v7038, %v7086
  %v7088 = vpop.f32.mrf.mxu0
  %7089 = vmatprep.mubr.bf16.mxu0 %v6775
  %7090 = vmatmul.mubr.bf16.gmra.mxu0 %v6774
  %v7091 = vpop.f32.mrf.mxu0
  %v7092 = vadd.f32 %v7043, %v7091
  %v7093 = vpop.f32.mrf.mxu0
  %v7094 = vpop.f32.mrf.mxu0
  %v7095 = vadd.f32 %v7046, %v7094
  %v7096 = vpop.f32.mrf.mxu0
  %7097 = vdwg.mxu0
  %7098 = vmatprep.subr.bf16.mxu0 0
  %7099 = vmatpush1.bf16.msra.mxu0 %v6926
  %7100 = vmatprep.subr.bf16.mxu0 0
  %7101 = vmatpush1.bf16.msra.mxu0 %v6925
  %7102 = vmatprep.subr.bf16.mxu0 0
  %7103 = vmatpush1.bf16.msra.mxu0 %v6924
  %7104 = vmatprep.subr.bf16.mxu0 0
  %7105 = vmatpush1.bf16.msra.mxu0 %v6923
  %7106 = vmatprep.subr.bf16.mxu0 0
  %7107 = vmatpush1.bf16.msra.mxu0 %v6922
  %7108 = vmatprep.subr.bf16.mxu0 0
  %7109 = vmatpush1.bf16.msra.mxu0 %v6921
  %7110 = vmatprep.subr.bf16.mxu0 0
  %7111 = vmatpush1.bf16.msra.mxu0 %v6920
  %7112 = vmatprep.subr.bf16.mxu0 0
  %7113 = vmatpush1.bf16.msra.mxu0 %v6919
  %7114 = vmatprep.subr.bf16.mxu0 0
  %7115 = vmatpush2.bf16.msra.mxu0 0
  %7116 = vmatprep.subr.bf16.mxu0 0
  %7117 = vmatpush2.bf16.msra.mxu0 0
  %7118 = vmatprep.subr.bf16.mxu0 0
  %7119 = vmatpush2.bf16.msra.mxu0 0
  %7120 = vmatprep.subr.bf16.mxu0 0
  %7121 = vmatpush2.bf16.msra.mxu0 0
  %7122 = vmatprep.subr.bf16.mxu0 0
  %7123 = vmatpush2.bf16.msra.mxu0 0
  %7124 = vmatprep.subr.bf16.mxu0 0
  %7125 = vmatpush2.bf16.msra.mxu0 0
  %7126 = vmatprep.subr.bf16.mxu0 0
  %7127 = vmatpush2.bf16.msra.mxu0 0
  %7128 = vmatprep.subr.bf16.mxu0 0
  %7129 = vmatpush2.bf16.msra.mxu0 0
  %7130 = vmatprep.mubr.bf16.mxu0 0
  %7131 = vmatmul.mubr.bf16.gmra.mxu0 %v6773
  %v7132 = vpop.f32.mrf.mxu0
  %v7133 = vadd.f32 %v7084, %v7132
  %v7134 = vpop.f32.mrf.mxu0
  %v7135 = vpop.f32.mrf.mxu0
  %v7136 = vadd.f32 %v7087, %v7135
  %v7137 = vpop.f32.mrf.mxu0
  %7138 = vmatprep.mubr.bf16.mxu0 0
  %7139 = vmatmul.mubr.bf16.gmra.mxu0 %v6776
  %v7140 = vpop.f32.mrf.mxu0
  %v7141 = vadd.f32 %v7092, %v7140
  %v7142 = vpop.f32.mrf.mxu0
  %v7143 = vpop.f32.mrf.mxu0
  %v7144 = vadd.f32 %v7095, %v7143
  %v7145 = vpop.f32.mrf.mxu0
  %7146 = vdwg.mxu0
  %v7195 = vunpack.c.l.b16 %v6723
  %v7196 = vunpack.c.l.b16 %v6724
  %v7197 = vunpack.c.l.b16 %v6725
  %v7198 = vunpack.c.l.b16 %v6726
  %v7199 = vunpack.c.l.b16 %v6727
  %v7200 = vunpack.c.l.b16 %v6728
  %v7201 = vunpack.c.l.b16 %v6729
  %v7202 = vunpack.c.l.b16 %v6730
  %v7203 = vunpack.c.l.b16 %v6731
  %v7204 = vunpack.c.l.b16 %v6732
  %v7205 = vunpack.c.l.b16 %v6733
  %v7206 = vunpack.c.l.b16 %v6734
  %v7207 = vunpack.c.l.b16 %v6735
  %v7208 = vunpack.c.l.b16 %v6736
  %v7209 = vunpack.c.l.b16 %v6737
  %v7210 = vunpack.c.l.b16 %v6738
  %v7211 = vunpack.c.l.b16 %v6739
  %v7212 = vunpack.c.l.b16 %v6740
  %v7213 = vunpack.c.l.b16 %v6741
  %v7214 = vunpack.c.l.b16 %v6742
  %v7215 = vunpack.c.l.b16 %v6743
  %v7216 = vunpack.c.l.b16 %v6744
  %v7217 = vunpack.c.l.b16 %v6745
  %v7218 = vunpack.c.l.b16 %v6746
  %v7219 = vunpack.c.l.b16 %v6747
  %v7220 = vunpack.c.l.b16 %v6748
  %v7221 = vunpack.c.l.b16 %v6749
  %v7222 = vunpack.c.l.b16 %v6750
  %v7223 = vunpack.c.l.b16 %v6751
  %v7224 = vunpack.c.l.b16 %v6752
  %v7225 = vunpack.c.l.b16 %v6753
  %v7226 = vunpack.c.l.b16 %v6754
  %v7227 = vunpack.c.l.b16 %v6755
  %v7228 = vunpack.c.l.b16 %v6756
  %v7229 = vunpack.c.l.b16 %v6757
  %v7230 = vunpack.c.l.b16 %v6758
  %v7231 = vunpack.c.l.b16 %v6759
  %v7232 = vunpack.c.l.b16 %v6760
  %v7233 = vunpack.c.l.b16 %v6761
  %v7234 = vunpack.c.l.b16 %v6762
  %v7235 = vunpack.c.l.b16 %v6763
  %v7236 = vunpack.c.l.b16 %v6764
  %v7237 = vunpack.c.l.b16 %v6765
  %v7238 = vunpack.c.l.b16 %v6766
  %v7239 = vunpack.c.l.b16 %v6767
  %v7240 = vunpack.c.l.b16 %v6768
  %v7241 = vunpack.c.l.b16 %v6769
  %v7242 = vunpack.c.l.b16 %v6770
  %v7243 = vpack.c.b16 %v7196, %v7195
  %v7244 = vpack.c.b16 %v7198, %v7197
  %v7245 = vpack.c.b16 %v7200, %v7199
  %v7246 = vpack.c.b16 %v7202, %v7201
  %v7247 = vpack.c.b16 %v7204, %v7203
  %v7248 = vpack.c.b16 %v7206, %v7205
  %v7249 = vpack.c.b16 %v7208, %v7207
  %v7250 = vpack.c.b16 %v7210, %v7209
  %v7251 = vpack.c.b16 %v7212, %v7211
  %v7252 = vpack.c.b16 %v7214, %v7213
  %v7253 = vpack.c.b16 %v7216, %v7215
  %v7254 = vpack.c.b16 %v7218, %v7217
  %v7255 = vpack.c.b16 %v7220, %v7219
  %v7256 = vpack.c.b16 %v7222, %v7221
  %v7257 = vpack.c.b16 %v7224, %v7223
  %v7258 = vpack.c.b16 %v7226, %v7225
  %v7259 = vpack.c.b16 %v7228, %v7227
  %v7260 = vpack.c.b16 %v7230, %v7229
  %v7261 = vpack.c.b16 %v7232, %v7231
  %v7262 = vpack.c.b16 %v7234, %v7233
  %v7263 = vpack.c.b16 %v7236, %v7235
  %v7264 = vpack.c.b16 %v7238, %v7237
  %v7265 = vpack.c.b16 %v7240, %v7239
  %v7266 = vpack.c.b16 %v7242, %v7241
  %7291 = vmatprep.subr.bf16.mxu0 0
  %7292 = vmatpush1.bf16.msra.mxu0 %v7250
  %7293 = vmatprep.subr.bf16.mxu0 0
  %7294 = vmatpush1.bf16.msra.mxu0 %v7249
  %7295 = vmatprep.subr.bf16.mxu0 0
  %7296 = vmatpush1.bf16.msra.mxu0 %v7248
  %7297 = vmatprep.subr.bf16.mxu0 0
  %7298 = vmatpush1.bf16.msra.mxu0 %v7247
  %7299 = vmatprep.subr.bf16.mxu0 0
  %7300 = vmatpush1.bf16.msra.mxu0 %v7246
  %7301 = vmatprep.subr.bf16.mxu0 0
  %7302 = vmatpush1.bf16.msra.mxu0 %v7245
  %7303 = vmatprep.subr.bf16.mxu0 0
  %7304 = vmatpush1.bf16.msra.mxu0 %v7244
  %7305 = vmatprep.subr.bf16.mxu0 0
  %7306 = vmatpush1.bf16.msra.mxu0 %v7243
  %7307 = vmatprep.subr.bf16.mxu0 0
  %7308 = vmatpush2.bf16.msra.mxu0 %v7258
  %7309 = vmatprep.subr.bf16.mxu0 0
  %7310 = vmatpush2.bf16.msra.mxu0 %v7257
  %7311 = vmatprep.subr.bf16.mxu0 0
  %7312 = vmatpush2.bf16.msra.mxu0 %v7256
  %7313 = vmatprep.subr.bf16.mxu0 0
  %7314 = vmatpush2.bf16.msra.mxu0 %v7255
  %7315 = vmatprep.subr.bf16.mxu0 0
  %7316 = vmatpush2.bf16.msra.mxu0 %v7254
  %7317 = vmatprep.subr.bf16.mxu0 0
  %7318 = vmatpush2.bf16.msra.mxu0 %v7253
  %7319 = vmatprep.subr.bf16.mxu0 0
  %7320 = vmatpush2.bf16.msra.mxu0 %v7252
  %7321 = vmatprep.subr.bf16.mxu0 0
  %7322 = vmatpush2.bf16.msra.mxu0 %v7251
  %7323 = vmatprep.mubr.bf16.mxu0 %v6772
  %7324 = vmatmul.mubr.bf16.gmra.mxu0 %v6771
  %v7325 = vpop.f32.mrf.mxu0
  %v7326 = vadd.f32 0.0, %v7325
  %v7327 = vpop.f32.mrf.mxu0
  %v7328 = vpop.f32.mrf.mxu0
  %v7329 = vadd.f32 0.0, %v7328
  %v7330 = vpop.f32.mrf.mxu0
  %7331 = vmatprep.mubr.bf16.mxu0 %v6775
  %7332 = vmatmul.mubr.bf16.gmra.mxu0 %v6774
  %v7333 = vpop.f32.mrf.mxu0
  %v7334 = vadd.f32 0.0, %v7333
  %v7335 = vpop.f32.mrf.mxu0
  %v7336 = vpop.f32.mrf.mxu0
  %v7337 = vadd.f32 0.0, %v7336
  %v7338 = vpop.f32.mrf.mxu0
  %7339 = vdwg.mxu0
  %7340 = vmatprep.subr.bf16.mxu0 0
  %7341 = vmatpush1.bf16.msra.mxu0 %v7266
  %7342 = vmatprep.subr.bf16.mxu0 0
  %7343 = vmatpush1.bf16.msra.mxu0 %v7265
  %7344 = vmatprep.subr.bf16.mxu0 0
  %7345 = vmatpush1.bf16.msra.mxu0 %v7264
  %7346 = vmatprep.subr.bf16.mxu0 0
  %7347 = vmatpush1.bf16.msra.mxu0 %v7263
  %7348 = vmatprep.subr.bf16.mxu0 0
  %7349 = vmatpush1.bf16.msra.mxu0 %v7262
  %7350 = vmatprep.subr.bf16.mxu0 0
  %7351 = vmatpush1.bf16.msra.mxu0 %v7261
  %7352 = vmatprep.subr.bf16.mxu0 0
  %7353 = vmatpush1.bf16.msra.mxu0 %v7260
  %7354 = vmatprep.subr.bf16.mxu0 0
  %7355 = vmatpush1.bf16.msra.mxu0 %v7259
  %7356 = vmatprep.subr.bf16.mxu0 0
  %7357 = vmatpush2.bf16.msra.mxu0 0
  %7358 = vmatprep.subr.bf16.mxu0 0
  %7359 = vmatpush2.bf16.msra.mxu0 0
  %7360 = vmatprep.subr.bf16.mxu0 0
  %7361 = vmatpush2.bf16.msra.mxu0 0
  %7362 = vmatprep.subr.bf16.mxu0 0
  %7363 = vmatpush2.bf16.msra.mxu0 0
  %7364 = vmatprep.subr.bf16.mxu0 0
  %7365 = vmatpush2.bf16.msra.mxu0 0
  %7366 = vmatprep.subr.bf16.mxu0 0
  %7367 = vmatpush2.bf16.msra.mxu0 0
  %7368 = vmatprep.subr.bf16.mxu0 0
  %7369 = vmatpush2.bf16.msra.mxu0 0
  %7370 = vmatprep.subr.bf16.mxu0 0
  %7371 = vmatpush2.bf16.msra.mxu0 0
  %7372 = vmatprep.mubr.bf16.mxu0 0
  %7373 = vmatmul.mubr.bf16.gmra.mxu0 %v6773
  %v7374 = vpop.f32.mrf.mxu0
  %v7375 = vadd.f32 %v7326, %v7374
  %v7376 = vpop.f32.mrf.mxu0
  %v7377 = vpop.f32.mrf.mxu0
  %v7378 = vadd.f32 %v7329, %v7377
  %v7379 = vpop.f32.mrf.mxu0
  %7380 = vmatprep.mubr.bf16.mxu0 0
  %7381 = vmatmul.mubr.bf16.gmra.mxu0 %v6776
  %v7382 = vpop.f32.mrf.mxu0
  %v7383 = vadd.f32 %v7334, %v7382
  %v7384 = vpop.f32.mrf.mxu0
  %v7385 = vpop.f32.mrf.mxu0
  %v7386 = vadd.f32 %v7337, %v7385
  %v7387 = vpop.f32.mrf.mxu0
  %7388 = vdwg.mxu0
  %v7389 = vadd.f32 %v7133, %v7375
  %v7390 = vadd.f32 %v7136, %v7378
  %v7391 = vadd.f32 %v7141, %v7383
  %v7392 = vadd.f32 %v7144, %v7386
  %v7393 = vadd.f32 %v6657, %v7389
  %v7394 = vadd.f32 %v6658, %v7390
  %v7395 = vadd.f32 %v6659, %v7391
  %v7396 = vadd.f32 %v6660, %v7392
  %v7397 = vld [vmem:[#allocation2 + $0x48] sm:$0xff]
  %v7398 = vld [vmem:[#allocation2 + $0x50] sm:$0xff]
  %v7399 = vld [vmem:[#allocation2 + $0x58] sm:$0xff]
  %v7400 = vld [vmem:[#allocation2 + $0x60] sm:$0xff]
  %v7401 = vld [vmem:[#allocation2 + $0x68] sm:$0xff]
  %v7402 = vld [vmem:[#allocation2 + $0x70] sm:$0xff]
  %v7403 = vld [vmem:[#allocation2 + $0x78] sm:$0xff]
  %v7404 = vld [vmem:[#allocation2 + $0x80] sm:$0xff]
  %v7405 = vld [vmem:[#allocation2 + $0x88] sm:$0xff]
  %v7406 = vld [vmem:[#allocation2 + $0x90] sm:$0xff]
  %v7407 = vld [vmem:[#allocation2 + $0x98] sm:$0xff]
  %v7408 = vld [vmem:[#allocation2 + $0xa0] sm:$0xff]
  %s7409 = scalar_lea.vmem %s5, 576
  %v7410 = vld [vmem:[%s7409] sm:$0xf]
  %v7411 = vld [vmem:[%s7409 + $0x4] sm:$0xf]
  %v7412 = vld [vmem:[%s7409 + $0x8] sm:$0xf]
  %v7413 = vld [vmem:[%s7409 + $0xc] sm:$0xf]
  %v7414 = vld [vmem:[%s7409 + $0x10] sm:$0xf]
  %v7415 = vld [vmem:[%s7409 + $0x14] sm:$0xf]
  %v7416 = vld [vmem:[%s7409 + $0x18] sm:$0xf]
  %v7417 = vld [vmem:[%s7409 + $0x1c] sm:$0xf]
  %v7418 = vld [vmem:[%s7409 + $0x20] sm:$0xf]
  %v7419 = vld [vmem:[%s7409 + $0x24] sm:$0xf]
  %v7420 = vld [vmem:[%s7409 + $0x28] sm:$0xf]
  %v7421 = vld [vmem:[%s7409 + $0x2c] sm:$0xf]
  %v7422 = vld [vmem:[%s7409 + $0x30] sm:$0xf]
  %v7423 = vld [vmem:[%s7409 + $0x34] sm:$0xf]
  %v7424 = vld [vmem:[%s7409 + $0x38] sm:$0xf]
  %v7425 = vld [vmem:[%s7409 + $0x3c] sm:$0xf]
  %v7426 = vld [vmem:[%s7409 + $0x40] sm:$0xf]
  %v7427 = vld [vmem:[%s7409 + $0x44] sm:$0xf]
  %v7428 = vld [vmem:[%s7409 + $0x48] sm:$0xf]
  %v7429 = vld [vmem:[%s7409 + $0x4c] sm:$0xf]
  %v7430 = vld [vmem:[%s7409 + $0x50] sm:$0xf]
  %v7431 = vld [vmem:[%s7409 + $0x54] sm:$0xf]
  %v7432 = vld [vmem:[%s7409 + $0x58] sm:$0xf]
  %v7433 = vld [vmem:[%s7409 + $0x5c] sm:$0xf]
  %v7434 = vld [vmem:[%s7409 + $0x60] sm:$0xf]
  %v7435 = vld [vmem:[%s7409 + $0x64] sm:$0xf]
  %v7436 = vld [vmem:[%s7409 + $0x68] sm:$0xf]
  %v7437 = vld [vmem:[%s7409 + $0x6c] sm:$0xf]
  %v7438 = vld [vmem:[%s7409 + $0x70] sm:$0xf]
  %v7439 = vld [vmem:[%s7409 + $0x74] sm:$0xf]
  %v7440 = vld [vmem:[%s7409 + $0x78] sm:$0xf]
  %v7441 = vld [vmem:[%s7409 + $0x7c] sm:$0xf]
  %v7442 = vld [vmem:[%s7409 + $0x80] sm:$0xf]
  %v7443 = vld [vmem:[%s7409 + $0x84] sm:$0xf]
  %v7444 = vld [vmem:[%s7409 + $0x88] sm:$0xf]
  %v7445 = vld [vmem:[%s7409 + $0x8c] sm:$0xf]
  %v7446 = vld [vmem:[%s7409 + $0x90] sm:$0xf]
  %v7447 = vld [vmem:[%s7409 + $0x94] sm:$0xf]
  %v7448 = vld [vmem:[%s7409 + $0x98] sm:$0xf]
  %v7449 = vld [vmem:[%s7409 + $0x9c] sm:$0xf]
  %v7450 = vld [vmem:[%s7409 + $0xa0] sm:$0xf]
  %v7451 = vld [vmem:[%s7409 + $0xa4] sm:$0xf]
  %v7452 = vld [vmem:[%s7409 + $0xa8] sm:$0xf]
  %v7453 = vld [vmem:[%s7409 + $0xac] sm:$0xf]
  %v7454 = vld [vmem:[%s7409 + $0xb0] sm:$0xf]
  %v7455 = vld [vmem:[%s7409 + $0xb4] sm:$0xf]
  %v7456 = vld [vmem:[%s7409 + $0xb8] sm:$0xf]
  %v7457 = vld [vmem:[%s7409 + $0xbc] sm:$0xf]
  %s7458 = scalar_lea.vmem %s6, 576
  %v7459 = vld [vmem:[%s7458] sm:$0xf]
  %v7460 = vld [vmem:[%s7458 + $0x4] sm:$0xf]
  %v7461 = vld [vmem:[%s7458 + $0x8] sm:$0xf]
  %v7462 = vld [vmem:[%s7458 + $0xc] sm:$0xf]
  %v7463 = vld [vmem:[%s7458 + $0x10] sm:$0xf]
  %v7464 = vld [vmem:[%s7458 + $0x14] sm:$0xf]
  %v7465 = vld [vmem:[%s7458 + $0x18] sm:$0xf]
  %v7466 = vld [vmem:[%s7458 + $0x1c] sm:$0xf]
  %v7467 = vld [vmem:[%s7458 + $0x20] sm:$0xf]
  %v7468 = vld [vmem:[%s7458 + $0x24] sm:$0xf]
  %v7469 = vld [vmem:[%s7458 + $0x28] sm:$0xf]
  %v7470 = vld [vmem:[%s7458 + $0x2c] sm:$0xf]
  %v7471 = vld [vmem:[%s7458 + $0x30] sm:$0xf]
  %v7472 = vld [vmem:[%s7458 + $0x34] sm:$0xf]
  %v7473 = vld [vmem:[%s7458 + $0x38] sm:$0xf]
  %v7474 = vld [vmem:[%s7458 + $0x3c] sm:$0xf]
  %v7475 = vld [vmem:[%s7458 + $0x40] sm:$0xf]
  %v7476 = vld [vmem:[%s7458 + $0x44] sm:$0xf]
  %v7477 = vld [vmem:[%s7458 + $0x48] sm:$0xf]
  %v7478 = vld [vmem:[%s7458 + $0x4c] sm:$0xf]
  %v7479 = vld [vmem:[%s7458 + $0x50] sm:$0xf]
  %v7480 = vld [vmem:[%s7458 + $0x54] sm:$0xf]
  %v7481 = vld [vmem:[%s7458 + $0x58] sm:$0xf]
  %v7482 = vld [vmem:[%s7458 + $0x5c] sm:$0xf]
  %v7483 = vld [vmem:[%s7458 + $0x60] sm:$0xf]
  %v7484 = vld [vmem:[%s7458 + $0x64] sm:$0xf]
  %v7485 = vld [vmem:[%s7458 + $0x68] sm:$0xf]
  %v7486 = vld [vmem:[%s7458 + $0x6c] sm:$0xf]
  %v7487 = vld [vmem:[%s7458 + $0x70] sm:$0xf]
  %v7488 = vld [vmem:[%s7458 + $0x74] sm:$0xf]
  %v7489 = vld [vmem:[%s7458 + $0x78] sm:$0xf]
  %v7490 = vld [vmem:[%s7458 + $0x7c] sm:$0xf]
  %v7491 = vld [vmem:[%s7458 + $0x80] sm:$0xf]
  %v7492 = vld [vmem:[%s7458 + $0x84] sm:$0xf]
  %v7493 = vld [vmem:[%s7458 + $0x88] sm:$0xf]
  %v7494 = vld [vmem:[%s7458 + $0x8c] sm:$0xf]
  %v7495 = vld [vmem:[%s7458 + $0x90] sm:$0xf]
  %v7496 = vld [vmem:[%s7458 + $0x94] sm:$0xf]
  %v7497 = vld [vmem:[%s7458 + $0x98] sm:$0xf]
  %v7498 = vld [vmem:[%s7458 + $0x9c] sm:$0xf]
  %v7499 = vld [vmem:[%s7458 + $0xa0] sm:$0xf]
  %v7500 = vld [vmem:[%s7458 + $0xa4] sm:$0xf]
  %v7501 = vld [vmem:[%s7458 + $0xa8] sm:$0xf]
  %v7502 = vld [vmem:[%s7458 + $0xac] sm:$0xf]
  %v7503 = vld [vmem:[%s7458 + $0xb0] sm:$0xf]
  %v7504 = vld [vmem:[%s7458 + $0xb4] sm:$0xf]
  %v7505 = vld [vmem:[%s7458 + $0xb8] sm:$0xf]
  %v7506 = vld [vmem:[%s7458 + $0xbc] sm:$0xf]
  %v7507 = vpack.c.bf16 %v7400, %v7397
  %v7508 = vpack.c.bf16 %v7401, %v7398
  %v7509 = vpack.c.bf16 %v7402, %v7399
  %v7510 = vpack.c.bf16 %v7406, %v7403
  %v7511 = vpack.c.bf16 %v7407, %v7404
  %v7512 = vpack.c.bf16 %v7408, %v7405
  %v7513 = vunpack.c.l.bf16 %v7507
  %v7514 = vunpack.c.l.bf16 %v7508
  %v7515 = vunpack.c.l.bf16 %v7509
  %v7516 = vunpack.c.h.bf16 %v7507
  %v7517 = vunpack.c.h.bf16 %v7508
  %v7518 = vunpack.c.h.bf16 %v7509
  %v7519 = vunpack.c.l.bf16 %v7510
  %v7520 = vunpack.c.l.bf16 %v7511
  %v7521 = vunpack.c.l.bf16 %v7512
  %v7522 = vunpack.c.h.bf16 %v7510
  %v7523 = vunpack.c.h.bf16 %v7511
  %v7524 = vunpack.c.h.bf16 %v7512
  %v7525 = vsub.f32 %v7397, %v7513
  %v7526 = vsub.f32 %v7398, %v7514
  %v7527 = vsub.f32 %v7399, %v7515
  %v7528 = vsub.f32 %v7400, %v7516
  %v7529 = vsub.f32 %v7401, %v7517
  %v7530 = vsub.f32 %v7402, %v7518
  %v7531 = vsub.f32 %v7403, %v7519
  %v7532 = vsub.f32 %v7404, %v7520
  %v7533 = vsub.f32 %v7405, %v7521
  %v7534 = vsub.f32 %v7406, %v7522
  %v7535 = vsub.f32 %v7407, %v7523
  %v7536 = vsub.f32 %v7408, %v7524
  %v7537 = vpack.c.bf16 %v7528, %v7525
  %v7538 = vpack.c.bf16 %v7529, %v7526
  %v7539 = vpack.c.bf16 %v7530, %v7527
  %v7540 = vpack.c.bf16 %v7534, %v7531
  %v7541 = vpack.c.bf16 %v7535, %v7532
  %v7542 = vpack.c.bf16 %v7536, %v7533
  %v7591 = vunpack.c.l.b16 %v7410
  %v7592 = vunpack.c.l.b16 %v7411
  %v7593 = vunpack.c.l.b16 %v7412
  %v7594 = vunpack.c.l.b16 %v7413
  %v7595 = vunpack.c.l.b16 %v7414
  %v7596 = vunpack.c.l.b16 %v7415
  %v7597 = vunpack.c.l.b16 %v7416
  %v7598 = vunpack.c.l.b16 %v7417
  %v7599 = vunpack.c.l.b16 %v7418
  %v7600 = vunpack.c.l.b16 %v7419
  %v7601 = vunpack.c.l.b16 %v7420
  %v7602 = vunpack.c.l.b16 %v7421
  %v7603 = vunpack.c.l.b16 %v7422
  %v7604 = vunpack.c.l.b16 %v7423
  %v7605 = vunpack.c.l.b16 %v7424
  %v7606 = vunpack.c.l.b16 %v7425
  %v7607 = vunpack.c.l.b16 %v7426
  %v7608 = vunpack.c.l.b16 %v7427
  %v7609 = vunpack.c.l.b16 %v7428
  %v7610 = vunpack.c.l.b16 %v7429
  %v7611 = vunpack.c.l.b16 %v7430
  %v7612 = vunpack.c.l.b16 %v7431
  %v7613 = vunpack.c.l.b16 %v7432
  %v7614 = vunpack.c.l.b16 %v7433
  %v7615 = vunpack.c.l.b16 %v7434
  %v7616 = vunpack.c.l.b16 %v7435
  %v7617 = vunpack.c.l.b16 %v7436
  %v7618 = vunpack.c.l.b16 %v7437
  %v7619 = vunpack.c.l.b16 %v7438
  %v7620 = vunpack.c.l.b16 %v7439
  %v7621 = vunpack.c.l.b16 %v7440
  %v7622 = vunpack.c.l.b16 %v7441
  %v7623 = vunpack.c.l.b16 %v7442
  %v7624 = vunpack.c.l.b16 %v7443
  %v7625 = vunpack.c.l.b16 %v7444
  %v7626 = vunpack.c.l.b16 %v7445
  %v7627 = vunpack.c.l.b16 %v7446
  %v7628 = vunpack.c.l.b16 %v7447
  %v7629 = vunpack.c.l.b16 %v7448
  %v7630 = vunpack.c.l.b16 %v7449
  %v7631 = vunpack.c.l.b16 %v7450
  %v7632 = vunpack.c.l.b16 %v7451
  %v7633 = vunpack.c.l.b16 %v7452
  %v7634 = vunpack.c.l.b16 %v7453
  %v7635 = vunpack.c.l.b16 %v7454
  %v7636 = vunpack.c.l.b16 %v7455
  %v7637 = vunpack.c.l.b16 %v7456
  %v7638 = vunpack.c.l.b16 %v7457
  %v7639 = vpack.c.b16 %v7592, %v7591
  %v7640 = vpack.c.b16 %v7594, %v7593
  %v7641 = vpack.c.b16 %v7596, %v7595
  %v7642 = vpack.c.b16 %v7598, %v7597
  %v7643 = vpack.c.b16 %v7600, %v7599
  %v7644 = vpack.c.b16 %v7602, %v7601
  %v7645 = vpack.c.b16 %v7604, %v7603
  %v7646 = vpack.c.b16 %v7606, %v7605
  %v7647 = vpack.c.b16 %v7608, %v7607
  %v7648 = vpack.c.b16 %v7610, %v7609
  %v7649 = vpack.c.b16 %v7612, %v7611
  %v7650 = vpack.c.b16 %v7614, %v7613
  %v7651 = vpack.c.b16 %v7616, %v7615
  %v7652 = vpack.c.b16 %v7618, %v7617
  %v7653 = vpack.c.b16 %v7620, %v7619
  %v7654 = vpack.c.b16 %v7622, %v7621
  %v7655 = vpack.c.b16 %v7624, %v7623
  %v7656 = vpack.c.b16 %v7626, %v7625
  %v7657 = vpack.c.b16 %v7628, %v7627
  %v7658 = vpack.c.b16 %v7630, %v7629
  %v7659 = vpack.c.b16 %v7632, %v7631
  %v7660 = vpack.c.b16 %v7634, %v7633
  %v7661 = vpack.c.b16 %v7636, %v7635
  %v7662 = vpack.c.b16 %v7638, %v7637
  %7687 = vmatprep.subr.bf16.mxu0 0
  %7688 = vmatpush1.bf16.msra.mxu0 %v7646
  %7689 = vmatprep.subr.bf16.mxu0 0
  %7690 = vmatpush1.bf16.msra.mxu0 %v7645
  %7691 = vmatprep.subr.bf16.mxu0 0
  %7692 = vmatpush1.bf16.msra.mxu0 %v7644
  %7693 = vmatprep.subr.bf16.mxu0 0
  %7694 = vmatpush1.bf16.msra.mxu0 %v7643
  %7695 = vmatprep.subr.bf16.mxu0 0
  %7696 = vmatpush1.bf16.msra.mxu0 %v7642
  %7697 = vmatprep.subr.bf16.mxu0 0
  %7698 = vmatpush1.bf16.msra.mxu0 %v7641
  %7699 = vmatprep.subr.bf16.mxu0 0
  %7700 = vmatpush1.bf16.msra.mxu0 %v7640
  %7701 = vmatprep.subr.bf16.mxu0 0
  %7702 = vmatpush1.bf16.msra.mxu0 %v7639
  %7703 = vmatprep.subr.bf16.mxu0 0
  %7704 = vmatpush2.bf16.msra.mxu0 %v7654
  %7705 = vmatprep.subr.bf16.mxu0 0
  %7706 = vmatpush2.bf16.msra.mxu0 %v7653
  %7707 = vmatprep.subr.bf16.mxu0 0
  %7708 = vmatpush2.bf16.msra.mxu0 %v7652
  %7709 = vmatprep.subr.bf16.mxu0 0
  %7710 = vmatpush2.bf16.msra.mxu0 %v7651
  %7711 = vmatprep.subr.bf16.mxu0 0
  %7712 = vmatpush2.bf16.msra.mxu0 %v7650
  %7713 = vmatprep.subr.bf16.mxu0 0
  %7714 = vmatpush2.bf16.msra.mxu0 %v7649
  %7715 = vmatprep.subr.bf16.mxu0 0
  %7716 = vmatpush2.bf16.msra.mxu0 %v7648
  %7717 = vmatprep.subr.bf16.mxu0 0
  %7718 = vmatpush2.bf16.msra.mxu0 %v7647
  %7719 = vmatprep.mubr.bf16.mxu0 %v7538
  %7720 = vmatmul.mubr.bf16.gmra.mxu0 %v7537
  %v7721 = vpop.f32.mrf.mxu0
  %v7722 = vadd.f32 0.0, %v7721
  %v7723 = vpop.f32.mrf.mxu0
  %v7724 = vpop.f32.mrf.mxu0
  %v7725 = vadd.f32 0.0, %v7724
  %v7726 = vpop.f32.mrf.mxu0
  %7727 = vmatprep.mubr.bf16.mxu0 %v7541
  %7728 = vmatmul.mubr.bf16.gmra.mxu0 %v7540
  %v7729 = vpop.f32.mrf.mxu0
  %v7730 = vadd.f32 0.0, %v7729
  %v7731 = vpop.f32.mrf.mxu0
  %v7732 = vpop.f32.mrf.mxu0
  %v7733 = vadd.f32 0.0, %v7732
  %v7734 = vpop.f32.mrf.mxu0
  %7735 = vdwg.mxu0
  %7736 = vmatprep.subr.bf16.mxu0 0
  %7737 = vmatpush1.bf16.msra.mxu0 %v7662
  %7738 = vmatprep.subr.bf16.mxu0 0
  %7739 = vmatpush1.bf16.msra.mxu0 %v7661
  %7740 = vmatprep.subr.bf16.mxu0 0
  %7741 = vmatpush1.bf16.msra.mxu0 %v7660
  %7742 = vmatprep.subr.bf16.mxu0 0
  %7743 = vmatpush1.bf16.msra.mxu0 %v7659
  %7744 = vmatprep.subr.bf16.mxu0 0
  %7745 = vmatpush1.bf16.msra.mxu0 %v7658
  %7746 = vmatprep.subr.bf16.mxu0 0
  %7747 = vmatpush1.bf16.msra.mxu0 %v7657
  %7748 = vmatprep.subr.bf16.mxu0 0
  %7749 = vmatpush1.bf16.msra.mxu0 %v7656
  %7750 = vmatprep.subr.bf16.mxu0 0
  %7751 = vmatpush1.bf16.msra.mxu0 %v7655
  %7752 = vmatprep.subr.bf16.mxu0 0
  %7753 = vmatpush2.bf16.msra.mxu0 0
  %7754 = vmatprep.subr.bf16.mxu0 0
  %7755 = vmatpush2.bf16.msra.mxu0 0
  %7756 = vmatprep.subr.bf16.mxu0 0
  %7757 = vmatpush2.bf16.msra.mxu0 0
  %7758 = vmatprep.subr.bf16.mxu0 0
  %7759 = vmatpush2.bf16.msra.mxu0 0
  %7760 = vmatprep.subr.bf16.mxu0 0
  %7761 = vmatpush2.bf16.msra.mxu0 0
  %7762 = vmatprep.subr.bf16.mxu0 0
  %7763 = vmatpush2.bf16.msra.mxu0 0
  %7764 = vmatprep.subr.bf16.mxu0 0
  %7765 = vmatpush2.bf16.msra.mxu0 0
  %7766 = vmatprep.subr.bf16.mxu0 0
  %7767 = vmatpush2.bf16.msra.mxu0 0
  %7768 = vmatprep.mubr.bf16.mxu0 0
  %7769 = vmatmul.mubr.bf16.gmra.mxu0 %v7539
  %v7770 = vpop.f32.mrf.mxu0
  %v7771 = vadd.f32 %v7722, %v7770
  %v7772 = vpop.f32.mrf.mxu0
  %v7773 = vpop.f32.mrf.mxu0
  %v7774 = vadd.f32 %v7725, %v7773
  %v7775 = vpop.f32.mrf.mxu0
  %7776 = vmatprep.mubr.bf16.mxu0 0
  %7777 = vmatmul.mubr.bf16.gmra.mxu0 %v7542
  %v7778 = vpop.f32.mrf.mxu0
  %v7779 = vadd.f32 %v7730, %v7778
  %v7780 = vpop.f32.mrf.mxu0
  %v7781 = vpop.f32.mrf.mxu0
  %v7782 = vadd.f32 %v7733, %v7781
  %v7783 = vpop.f32.mrf.mxu0
  %7784 = vdwg.mxu0
  %7785 = vmatprep.subr.bf16.mxu0 0
  %7786 = vmatpush1.bf16.msra.mxu0 %v7646
  %7787 = vmatprep.subr.bf16.mxu0 0
  %7788 = vmatpush1.bf16.msra.mxu0 %v7645
  %7789 = vmatprep.subr.bf16.mxu0 0
  %7790 = vmatpush1.bf16.msra.mxu0 %v7644
  %7791 = vmatprep.subr.bf16.mxu0 0
  %7792 = vmatpush1.bf16.msra.mxu0 %v7643
  %7793 = vmatprep.subr.bf16.mxu0 0
  %7794 = vmatpush1.bf16.msra.mxu0 %v7642
  %7795 = vmatprep.subr.bf16.mxu0 0
  %7796 = vmatpush1.bf16.msra.mxu0 %v7641
  %7797 = vmatprep.subr.bf16.mxu0 0
  %7798 = vmatpush1.bf16.msra.mxu0 %v7640
  %7799 = vmatprep.subr.bf16.mxu0 0
  %7800 = vmatpush1.bf16.msra.mxu0 %v7639
  %7801 = vmatprep.subr.bf16.mxu0 0
  %7802 = vmatpush2.bf16.msra.mxu0 %v7654
  %7803 = vmatprep.subr.bf16.mxu0 0
  %7804 = vmatpush2.bf16.msra.mxu0 %v7653
  %7805 = vmatprep.subr.bf16.mxu0 0
  %7806 = vmatpush2.bf16.msra.mxu0 %v7652
  %7807 = vmatprep.subr.bf16.mxu0 0
  %7808 = vmatpush2.bf16.msra.mxu0 %v7651
  %7809 = vmatprep.subr.bf16.mxu0 0
  %7810 = vmatpush2.bf16.msra.mxu0 %v7650
  %7811 = vmatprep.subr.bf16.mxu0 0
  %7812 = vmatpush2.bf16.msra.mxu0 %v7649
  %7813 = vmatprep.subr.bf16.mxu0 0
  %7814 = vmatpush2.bf16.msra.mxu0 %v7648
  %7815 = vmatprep.subr.bf16.mxu0 0
  %7816 = vmatpush2.bf16.msra.mxu0 %v7647
  %7817 = vmatprep.mubr.bf16.mxu0 %v7508
  %7818 = vmatmul.mubr.bf16.gmra.mxu0 %v7507
  %v7819 = vpop.f32.mrf.mxu0
  %v7820 = vadd.f32 %v7771, %v7819
  %v7821 = vpop.f32.mrf.mxu0
  %v7822 = vpop.f32.mrf.mxu0
  %v7823 = vadd.f32 %v7774, %v7822
  %v7824 = vpop.f32.mrf.mxu0
  %7825 = vmatprep.mubr.bf16.mxu0 %v7511
  %7826 = vmatmul.mubr.bf16.gmra.mxu0 %v7510
  %v7827 = vpop.f32.mrf.mxu0
  %v7828 = vadd.f32 %v7779, %v7827
  %v7829 = vpop.f32.mrf.mxu0
  %v7830 = vpop.f32.mrf.mxu0
  %v7831 = vadd.f32 %v7782, %v7830
  %v7832 = vpop.f32.mrf.mxu0
  %7833 = vdwg.mxu0
  %7834 = vmatprep.subr.bf16.mxu0 0
  %7835 = vmatpush1.bf16.msra.mxu0 %v7662
  %7836 = vmatprep.subr.bf16.mxu0 0
  %7837 = vmatpush1.bf16.msra.mxu0 %v7661
  %7838 = vmatprep.subr.bf16.mxu0 0
  %7839 = vmatpush1.bf16.msra.mxu0 %v7660
  %7840 = vmatprep.subr.bf16.mxu0 0
  %7841 = vmatpush1.bf16.msra.mxu0 %v7659
  %7842 = vmatprep.subr.bf16.mxu0 0
  %7843 = vmatpush1.bf16.msra.mxu0 %v7658
  %7844 = vmatprep.subr.bf16.mxu0 0
  %7845 = vmatpush1.bf16.msra.mxu0 %v7657
  %7846 = vmatprep.subr.bf16.mxu0 0
  %7847 = vmatpush1.bf16.msra.mxu0 %v7656
  %7848 = vmatprep.subr.bf16.mxu0 0
  %7849 = vmatpush1.bf16.msra.mxu0 %v7655
  %7850 = vmatprep.subr.bf16.mxu0 0
  %7851 = vmatpush2.bf16.msra.mxu0 0
  %7852 = vmatprep.subr.bf16.mxu0 0
  %7853 = vmatpush2.bf16.msra.mxu0 0
  %7854 = vmatprep.subr.bf16.mxu0 0
  %7855 = vmatpush2.bf16.msra.mxu0 0
  %7856 = vmatprep.subr.bf16.mxu0 0
  %7857 = vmatpush2.bf16.msra.mxu0 0
  %7858 = vmatprep.subr.bf16.mxu0 0
  %7859 = vmatpush2.bf16.msra.mxu0 0
  %7860 = vmatprep.subr.bf16.mxu0 0
  %7861 = vmatpush2.bf16.msra.mxu0 0
  %7862 = vmatprep.subr.bf16.mxu0 0
  %7863 = vmatpush2.bf16.msra.mxu0 0
  %7864 = vmatprep.subr.bf16.mxu0 0
  %7865 = vmatpush2.bf16.msra.mxu0 0
  %7866 = vmatprep.mubr.bf16.mxu0 0
  %7867 = vmatmul.mubr.bf16.gmra.mxu0 %v7509
  %v7868 = vpop.f32.mrf.mxu0
  %v7869 = vadd.f32 %v7820, %v7868
  %v7870 = vpop.f32.mrf.mxu0
  %v7871 = vpop.f32.mrf.mxu0
  %v7872 = vadd.f32 %v7823, %v7871
  %v7873 = vpop.f32.mrf.mxu0
  %7874 = vmatprep.mubr.bf16.mxu0 0
  %7875 = vmatmul.mubr.bf16.gmra.mxu0 %v7512
  %v7876 = vpop.f32.mrf.mxu0
  %v7877 = vadd.f32 %v7828, %v7876
  %v7878 = vpop.f32.mrf.mxu0
  %v7879 = vpop.f32.mrf.mxu0
  %v7880 = vadd.f32 %v7831, %v7879
  %v7881 = vpop.f32.mrf.mxu0
  %7882 = vdwg.mxu0
  %v7931 = vunpack.c.l.b16 %v7459
  %v7932 = vunpack.c.l.b16 %v7460
  %v7933 = vunpack.c.l.b16 %v7461
  %v7934 = vunpack.c.l.b16 %v7462
  %v7935 = vunpack.c.l.b16 %v7463
  %v7936 = vunpack.c.l.b16 %v7464
  %v7937 = vunpack.c.l.b16 %v7465
  %v7938 = vunpack.c.l.b16 %v7466
  %v7939 = vunpack.c.l.b16 %v7467
  %v7940 = vunpack.c.l.b16 %v7468
  %v7941 = vunpack.c.l.b16 %v7469
  %v7942 = vunpack.c.l.b16 %v7470
  %v7943 = vunpack.c.l.b16 %v7471
  %v7944 = vunpack.c.l.b16 %v7472
  %v7945 = vunpack.c.l.b16 %v7473
  %v7946 = vunpack.c.l.b16 %v7474
  %v7947 = vunpack.c.l.b16 %v7475
  %v7948 = vunpack.c.l.b16 %v7476
  %v7949 = vunpack.c.l.b16 %v7477
  %v7950 = vunpack.c.l.b16 %v7478
  %v7951 = vunpack.c.l.b16 %v7479
  %v7952 = vunpack.c.l.b16 %v7480
  %v7953 = vunpack.c.l.b16 %v7481
  %v7954 = vunpack.c.l.b16 %v7482
  %v7955 = vunpack.c.l.b16 %v7483
  %v7956 = vunpack.c.l.b16 %v7484
  %v7957 = vunpack.c.l.b16 %v7485
  %v7958 = vunpack.c.l.b16 %v7486
  %v7959 = vunpack.c.l.b16 %v7487
  %v7960 = vunpack.c.l.b16 %v7488
  %v7961 = vunpack.c.l.b16 %v7489
  %v7962 = vunpack.c.l.b16 %v7490
  %v7963 = vunpack.c.l.b16 %v7491
  %v7964 = vunpack.c.l.b16 %v7492
  %v7965 = vunpack.c.l.b16 %v7493
  %v7966 = vunpack.c.l.b16 %v7494
  %v7967 = vunpack.c.l.b16 %v7495
  %v7968 = vunpack.c.l.b16 %v7496
  %v7969 = vunpack.c.l.b16 %v7497
  %v7970 = vunpack.c.l.b16 %v7498
  %v7971 = vunpack.c.l.b16 %v7499
  %v7972 = vunpack.c.l.b16 %v7500
  %v7973 = vunpack.c.l.b16 %v7501
  %v7974 = vunpack.c.l.b16 %v7502
  %v7975 = vunpack.c.l.b16 %v7503
  %v7976 = vunpack.c.l.b16 %v7504
  %v7977 = vunpack.c.l.b16 %v7505
  %v7978 = vunpack.c.l.b16 %v7506
  %v7979 = vpack.c.b16 %v7932, %v7931
  %v7980 = vpack.c.b16 %v7934, %v7933
  %v7981 = vpack.c.b16 %v7936, %v7935
  %v7982 = vpack.c.b16 %v7938, %v7937
  %v7983 = vpack.c.b16 %v7940, %v7939
  %v7984 = vpack.c.b16 %v7942, %v7941
  %v7985 = vpack.c.b16 %v7944, %v7943
  %v7986 = vpack.c.b16 %v7946, %v7945
  %v7987 = vpack.c.b16 %v7948, %v7947
  %v7988 = vpack.c.b16 %v7950, %v7949
  %v7989 = vpack.c.b16 %v7952, %v7951
  %v7990 = vpack.c.b16 %v7954, %v7953
  %v7991 = vpack.c.b16 %v7956, %v7955
  %v7992 = vpack.c.b16 %v7958, %v7957
  %v7993 = vpack.c.b16 %v7960, %v7959
  %v7994 = vpack.c.b16 %v7962, %v7961
  %v7995 = vpack.c.b16 %v7964, %v7963
  %v7996 = vpack.c.b16 %v7966, %v7965
  %v7997 = vpack.c.b16 %v7968, %v7967
  %v7998 = vpack.c.b16 %v7970, %v7969
  %v7999 = vpack.c.b16 %v7972, %v7971
  %v8000 = vpack.c.b16 %v7974, %v7973
  %v8001 = vpack.c.b16 %v7976, %v7975
  %v8002 = vpack.c.b16 %v7978, %v7977
  %8027 = vmatprep.subr.bf16.mxu0 0
  %8028 = vmatpush1.bf16.msra.mxu0 %v7986
  %8029 = vmatprep.subr.bf16.mxu0 0
  %8030 = vmatpush1.bf16.msra.mxu0 %v7985
  %8031 = vmatprep.subr.bf16.mxu0 0
  %8032 = vmatpush1.bf16.msra.mxu0 %v7984
  %8033 = vmatprep.subr.bf16.mxu0 0
  %8034 = vmatpush1.bf16.msra.mxu0 %v7983
  %8035 = vmatprep.subr.bf16.mxu0 0
  %8036 = vmatpush1.bf16.msra.mxu0 %v7982
  %8037 = vmatprep.subr.bf16.mxu0 0
  %8038 = vmatpush1.bf16.msra.mxu0 %v7981
  %8039 = vmatprep.subr.bf16.mxu0 0
  %8040 = vmatpush1.bf16.msra.mxu0 %v7980
  %8041 = vmatprep.subr.bf16.mxu0 0
  %8042 = vmatpush1.bf16.msra.mxu0 %v7979
  %8043 = vmatprep.subr.bf16.mxu0 0
  %8044 = vmatpush2.bf16.msra.mxu0 %v7994
  %8045 = vmatprep.subr.bf16.mxu0 0
  %8046 = vmatpush2.bf16.msra.mxu0 %v7993
  %8047 = vmatprep.subr.bf16.mxu0 0
  %8048 = vmatpush2.bf16.msra.mxu0 %v7992
  %8049 = vmatprep.subr.bf16.mxu0 0
  %8050 = vmatpush2.bf16.msra.mxu0 %v7991
  %8051 = vmatprep.subr.bf16.mxu0 0
  %8052 = vmatpush2.bf16.msra.mxu0 %v7990
  %8053 = vmatprep.subr.bf16.mxu0 0
  %8054 = vmatpush2.bf16.msra.mxu0 %v7989
  %8055 = vmatprep.subr.bf16.mxu0 0
  %8056 = vmatpush2.bf16.msra.mxu0 %v7988
  %8057 = vmatprep.subr.bf16.mxu0 0
  %8058 = vmatpush2.bf16.msra.mxu0 %v7987
  %8059 = vmatprep.mubr.bf16.mxu0 %v7508
  %8060 = vmatmul.mubr.bf16.gmra.mxu0 %v7507
  %v8061 = vpop.f32.mrf.mxu0
  %v8062 = vadd.f32 0.0, %v8061
  %v8063 = vpop.f32.mrf.mxu0
  %v8064 = vpop.f32.mrf.mxu0
  %v8065 = vadd.f32 0.0, %v8064
  %v8066 = vpop.f32.mrf.mxu0
  %8067 = vmatprep.mubr.bf16.mxu0 %v7511
  %8068 = vmatmul.mubr.bf16.gmra.mxu0 %v7510
  %v8069 = vpop.f32.mrf.mxu0
  %v8070 = vadd.f32 0.0, %v8069
  %v8071 = vpop.f32.mrf.mxu0
  %v8072 = vpop.f32.mrf.mxu0
  %v8073 = vadd.f32 0.0, %v8072
  %v8074 = vpop.f32.mrf.mxu0
  %8075 = vdwg.mxu0
  %8076 = vmatprep.subr.bf16.mxu0 0
  %8077 = vmatpush1.bf16.msra.mxu0 %v8002
  %8078 = vmatprep.subr.bf16.mxu0 0
  %8079 = vmatpush1.bf16.msra.mxu0 %v8001
  %8080 = vmatprep.subr.bf16.mxu0 0
  %8081 = vmatpush1.bf16.msra.mxu0 %v8000
  %8082 = vmatprep.subr.bf16.mxu0 0
  %8083 = vmatpush1.bf16.msra.mxu0 %v7999
  %8084 = vmatprep.subr.bf16.mxu0 0
  %8085 = vmatpush1.bf16.msra.mxu0 %v7998
  %8086 = vmatprep.subr.bf16.mxu0 0
  %8087 = vmatpush1.bf16.msra.mxu0 %v7997
  %8088 = vmatprep.subr.bf16.mxu0 0
  %8089 = vmatpush1.bf16.msra.mxu0 %v7996
  %8090 = vmatprep.subr.bf16.mxu0 0
  %8091 = vmatpush1.bf16.msra.mxu0 %v7995
  %8092 = vmatprep.subr.bf16.mxu0 0
  %8093 = vmatpush2.bf16.msra.mxu0 0
  %8094 = vmatprep.subr.bf16.mxu0 0
  %8095 = vmatpush2.bf16.msra.mxu0 0
  %8096 = vmatprep.subr.bf16.mxu0 0
  %8097 = vmatpush2.bf16.msra.mxu0 0
  %8098 = vmatprep.subr.bf16.mxu0 0
  %8099 = vmatpush2.bf16.msra.mxu0 0
  %8100 = vmatprep.subr.bf16.mxu0 0
  %8101 = vmatpush2.bf16.msra.mxu0 0
  %8102 = vmatprep.subr.bf16.mxu0 0
  %8103 = vmatpush2.bf16.msra.mxu0 0
  %8104 = vmatprep.subr.bf16.mxu0 0
  %8105 = vmatpush2.bf16.msra.mxu0 0
  %8106 = vmatprep.subr.bf16.mxu0 0
  %8107 = vmatpush2.bf16.msra.mxu0 0
  %8108 = vmatprep.mubr.bf16.mxu0 0
  %8109 = vmatmul.mubr.bf16.gmra.mxu0 %v7509
  %v8110 = vpop.f32.mrf.mxu0
  %v8111 = vadd.f32 %v8062, %v8110
  %v8112 = vpop.f32.mrf.mxu0
  %v8113 = vpop.f32.mrf.mxu0
  %v8114 = vadd.f32 %v8065, %v8113
  %v8115 = vpop.f32.mrf.mxu0
  %8116 = vmatprep.mubr.bf16.mxu0 0
  %8117 = vmatmul.mubr.bf16.gmra.mxu0 %v7512
  %v8118 = vpop.f32.mrf.mxu0
  %v8119 = vadd.f32 %v8070, %v8118
  %v8120 = vpop.f32.mrf.mxu0
  %v8121 = vpop.f32.mrf.mxu0
  %v8122 = vadd.f32 %v8073, %v8121
  %v8123 = vpop.f32.mrf.mxu0
  %8124 = vdwg.mxu0
  %v8125 = vadd.f32 %v7869, %v8111
  %v8126 = vadd.f32 %v7872, %v8114
  %v8127 = vadd.f32 %v7877, %v8119
  %v8128 = vadd.f32 %v7880, %v8122
  %v8129 = vadd.f32 %v7393, %v8125
  %v8130 = vadd.f32 %v7394, %v8126
  %v8131 = vadd.f32 %v7395, %v8127
  %v8132 = vadd.f32 %v7396, %v8128
  %v8133 = vld [vmem:[#allocation2 + $0x60] sm:$0xff]
  %v8134 = vld [vmem:[#allocation2 + $0x68] sm:$0xff]
  %v8135 = vld [vmem:[#allocation2 + $0x70] sm:$0xff]
  %v8136 = vld [vmem:[#allocation2 + $0x78] sm:$0xff]
  %v8137 = vld [vmem:[#allocation2 + $0x80] sm:$0xff]
  %v8138 = vld [vmem:[#allocation2 + $0x88] sm:$0xff]
  %v8139 = vld [vmem:[#allocation2 + $0x90] sm:$0xff]
  %v8140 = vld [vmem:[#allocation2 + $0x98] sm:$0xff]
  %v8141 = vld [vmem:[#allocation2 + $0xa0] sm:$0xff]
  %v8142 = vld [vmem:[#allocation2 + $0xa8] sm:$0xff]
  %v8143 = vld [vmem:[#allocation2 + $0xb0] sm:$0xff]
  %v8144 = vld [vmem:[#allocation2 + $0xb8] sm:$0xff]
  %s8145 = scalar_lea.vmem %s5, 768
  %v8146 = vld [vmem:[%s8145] sm:$0xf]
  %v8147 = vld [vmem:[%s8145 + $0x4] sm:$0xf]
  %v8148 = vld [vmem:[%s8145 + $0x8] sm:$0xf]
  %v8149 = vld [vmem:[%s8145 + $0xc] sm:$0xf]
  %v8150 = vld [vmem:[%s8145 + $0x10] sm:$0xf]
  %v8151 = vld [vmem:[%s8145 + $0x14] sm:$0xf]
  %v8152 = vld [vmem:[%s8145 + $0x18] sm:$0xf]
  %v8153 = vld [vmem:[%s8145 + $0x1c] sm:$0xf]
  %v8154 = vld [vmem:[%s8145 + $0x20] sm:$0xf]
  %v8155 = vld [vmem:[%s8145 + $0x24] sm:$0xf]
  %v8156 = vld [vmem:[%s8145 + $0x28] sm:$0xf]
  %v8157 = vld [vmem:[%s8145 + $0x2c] sm:$0xf]
  %v8158 = vld [vmem:[%s8145 + $0x30] sm:$0xf]
  %v8159 = vld [vmem:[%s8145 + $0x34] sm:$0xf]
  %v8160 = vld [vmem:[%s8145 + $0x38] sm:$0xf]
  %v8161 = vld [vmem:[%s8145 + $0x3c] sm:$0xf]
  %v8162 = vld [vmem:[%s8145 + $0x40] sm:$0xf]
  %v8163 = vld [vmem:[%s8145 + $0x44] sm:$0xf]
  %v8164 = vld [vmem:[%s8145 + $0x48] sm:$0xf]
  %v8165 = vld [vmem:[%s8145 + $0x4c] sm:$0xf]
  %v8166 = vld [vmem:[%s8145 + $0x50] sm:$0xf]
  %v8167 = vld [vmem:[%s8145 + $0x54] sm:$0xf]
  %v8168 = vld [vmem:[%s8145 + $0x58] sm:$0xf]
  %v8169 = vld [vmem:[%s8145 + $0x5c] sm:$0xf]
  %v8170 = vld [vmem:[%s8145 + $0x60] sm:$0xf]
  %v8171 = vld [vmem:[%s8145 + $0x64] sm:$0xf]
  %v8172 = vld [vmem:[%s8145 + $0x68] sm:$0xf]
  %v8173 = vld [vmem:[%s8145 + $0x6c] sm:$0xf]
  %v8174 = vld [vmem:[%s8145 + $0x70] sm:$0xf]
  %v8175 = vld [vmem:[%s8145 + $0x74] sm:$0xf]
  %v8176 = vld [vmem:[%s8145 + $0x78] sm:$0xf]
  %v8177 = vld [vmem:[%s8145 + $0x7c] sm:$0xf]
  %v8178 = vld [vmem:[%s8145 + $0x80] sm:$0xf]
  %v8179 = vld [vmem:[%s8145 + $0x84] sm:$0xf]
  %v8180 = vld [vmem:[%s8145 + $0x88] sm:$0xf]
  %v8181 = vld [vmem:[%s8145 + $0x8c] sm:$0xf]
  %v8182 = vld [vmem:[%s8145 + $0x90] sm:$0xf]
  %v8183 = vld [vmem:[%s8145 + $0x94] sm:$0xf]
  %v8184 = vld [vmem:[%s8145 + $0x98] sm:$0xf]
  %v8185 = vld [vmem:[%s8145 + $0x9c] sm:$0xf]
  %v8186 = vld [vmem:[%s8145 + $0xa0] sm:$0xf]
  %v8187 = vld [vmem:[%s8145 + $0xa4] sm:$0xf]
  %v8188 = vld [vmem:[%s8145 + $0xa8] sm:$0xf]
  %v8189 = vld [vmem:[%s8145 + $0xac] sm:$0xf]
  %v8190 = vld [vmem:[%s8145 + $0xb0] sm:$0xf]
  %v8191 = vld [vmem:[%s8145 + $0xb4] sm:$0xf]
  %v8192 = vld [vmem:[%s8145 + $0xb8] sm:$0xf]
  %v8193 = vld [vmem:[%s8145 + $0xbc] sm:$0xf]
  %s8194 = scalar_lea.vmem %s6, 768
  %v8195 = vld [vmem:[%s8194] sm:$0xf]
  %v8196 = vld [vmem:[%s8194 + $0x4] sm:$0xf]
  %v8197 = vld [vmem:[%s8194 + $0x8] sm:$0xf]
  %v8198 = vld [vmem:[%s8194 + $0xc] sm:$0xf]
  %v8199 = vld [vmem:[%s8194 + $0x10] sm:$0xf]
  %v8200 = vld [vmem:[%s8194 + $0x14] sm:$0xf]
  %v8201 = vld [vmem:[%s8194 + $0x18] sm:$0xf]
  %v8202 = vld [vmem:[%s8194 + $0x1c] sm:$0xf]
  %v8203 = vld [vmem:[%s8194 + $0x20] sm:$0xf]
  %v8204 = vld [vmem:[%s8194 + $0x24] sm:$0xf]
  %v8205 = vld [vmem:[%s8194 + $0x28] sm:$0xf]
  %v8206 = vld [vmem:[%s8194 + $0x2c] sm:$0xf]
  %v8207 = vld [vmem:[%s8194 + $0x30] sm:$0xf]
  %v8208 = vld [vmem:[%s8194 + $0x34] sm:$0xf]
  %v8209 = vld [vmem:[%s8194 + $0x38] sm:$0xf]
  %v8210 = vld [vmem:[%s8194 + $0x3c] sm:$0xf]
  %v8211 = vld [vmem:[%s8194 + $0x40] sm:$0xf]
  %v8212 = vld [vmem:[%s8194 + $0x44] sm:$0xf]
  %v8213 = vld [vmem:[%s8194 + $0x48] sm:$0xf]
  %v8214 = vld [vmem:[%s8194 + $0x4c] sm:$0xf]
  %v8215 = vld [vmem:[%s8194 + $0x50] sm:$0xf]
  %v8216 = vld [vmem:[%s8194 + $0x54] sm:$0xf]
  %v8217 = vld [vmem:[%s8194 + $0x58] sm:$0xf]
  %v8218 = vld [vmem:[%s8194 + $0x5c] sm:$0xf]
  %v8219 = vld [vmem:[%s8194 + $0x60] sm:$0xf]
  %v8220 = vld [vmem:[%s8194 + $0x64] sm:$0xf]
  %v8221 = vld [vmem:[%s8194 + $0x68] sm:$0xf]
  %v8222 = vld [vmem:[%s8194 + $0x6c] sm:$0xf]
  %v8223 = vld [vmem:[%s8194 + $0x70] sm:$0xf]
  %v8224 = vld [vmem:[%s8194 + $0x74] sm:$0xf]
  %v8225 = vld [vmem:[%s8194 + $0x78] sm:$0xf]
  %v8226 = vld [vmem:[%s8194 + $0x7c] sm:$0xf]
  %v8227 = vld [vmem:[%s8194 + $0x80] sm:$0xf]
  %v8228 = vld [vmem:[%s8194 + $0x84] sm:$0xf]
  %v8229 = vld [vmem:[%s8194 + $0x88] sm:$0xf]
  %v8230 = vld [vmem:[%s8194 + $0x8c] sm:$0xf]
  %v8231 = vld [vmem:[%s8194 + $0x90] sm:$0xf]
  %v8232 = vld [vmem:[%s8194 + $0x94] sm:$0xf]
  %v8233 = vld [vmem:[%s8194 + $0x98] sm:$0xf]
  %v8234 = vld [vmem:[%s8194 + $0x9c] sm:$0xf]
  %v8235 = vld [vmem:[%s8194 + $0xa0] sm:$0xf]
  %v8236 = vld [vmem:[%s8194 + $0xa4] sm:$0xf]
  %v8237 = vld [vmem:[%s8194 + $0xa8] sm:$0xf]
  %v8238 = vld [vmem:[%s8194 + $0xac] sm:$0xf]
  %v8239 = vld [vmem:[%s8194 + $0xb0] sm:$0xf]
  %v8240 = vld [vmem:[%s8194 + $0xb4] sm:$0xf]
  %v8241 = vld [vmem:[%s8194 + $0xb8] sm:$0xf]
  %v8242 = vld [vmem:[%s8194 + $0xbc] sm:$0xf]
  %v8243 = vpack.c.bf16 %v8136, %v8133
  %v8244 = vpack.c.bf16 %v8137, %v8134
  %v8245 = vpack.c.bf16 %v8138, %v8135
  %v8246 = vpack.c.bf16 %v8142, %v8139
  %v8247 = vpack.c.bf16 %v8143, %v8140
  %v8248 = vpack.c.bf16 %v8144, %v8141
  %v8249 = vunpack.c.l.bf16 %v8243
  %v8250 = vunpack.c.l.bf16 %v8244
  %v8251 = vunpack.c.l.bf16 %v8245
  %v8252 = vunpack.c.h.bf16 %v8243
  %v8253 = vunpack.c.h.bf16 %v8244
  %v8254 = vunpack.c.h.bf16 %v8245
  %v8255 = vunpack.c.l.bf16 %v8246
  %v8256 = vunpack.c.l.bf16 %v8247
  %v8257 = vunpack.c.l.bf16 %v8248
  %v8258 = vunpack.c.h.bf16 %v8246
  %v8259 = vunpack.c.h.bf16 %v8247
  %v8260 = vunpack.c.h.bf16 %v8248
  %v8261 = vsub.f32 %v8133, %v8249
  %v8262 = vsub.f32 %v8134, %v8250
  %v8263 = vsub.f32 %v8135, %v8251
  %v8264 = vsub.f32 %v8136, %v8252
  %v8265 = vsub.f32 %v8137, %v8253
  %v8266 = vsub.f32 %v8138, %v8254
  %v8267 = vsub.f32 %v8139, %v8255
  %v8268 = vsub.f32 %v8140, %v8256
  %v8269 = vsub.f32 %v8141, %v8257
  %v8270 = vsub.f32 %v8142, %v8258
  %v8271 = vsub.f32 %v8143, %v8259
  %v8272 = vsub.f32 %v8144, %v8260
  %v8273 = vpack.c.bf16 %v8264, %v8261
  %v8274 = vpack.c.bf16 %v8265, %v8262
  %v8275 = vpack.c.bf16 %v8266, %v8263
  %v8276 = vpack.c.bf16 %v8270, %v8267
  %v8277 = vpack.c.bf16 %v8271, %v8268
  %v8278 = vpack.c.bf16 %v8272, %v8269
  %v8327 = vunpack.c.l.b16 %v8146
  %v8328 = vunpack.c.l.b16 %v8147
  %v8329 = vunpack.c.l.b16 %v8148
  %v8330 = vunpack.c.l.b16 %v8149
  %v8331 = vunpack.c.l.b16 %v8150
  %v8332 = vunpack.c.l.b16 %v8151
  %v8333 = vunpack.c.l.b16 %v8152
  %v8334 = vunpack.c.l.b16 %v8153
  %v8335 = vunpack.c.l.b16 %v8154
  %v8336 = vunpack.c.l.b16 %v8155
  %v8337 = vunpack.c.l.b16 %v8156
  %v8338 = vunpack.c.l.b16 %v8157
  %v8339 = vunpack.c.l.b16 %v8158
  %v8340 = vunpack.c.l.b16 %v8159
  %v8341 = vunpack.c.l.b16 %v8160
  %v8342 = vunpack.c.l.b16 %v8161
  %v8343 = vunpack.c.l.b16 %v8162
  %v8344 = vunpack.c.l.b16 %v8163
  %v8345 = vunpack.c.l.b16 %v8164
  %v8346 = vunpack.c.l.b16 %v8165
  %v8347 = vunpack.c.l.b16 %v8166
  %v8348 = vunpack.c.l.b16 %v8167
  %v8349 = vunpack.c.l.b16 %v8168
  %v8350 = vunpack.c.l.b16 %v8169
  %v8351 = vunpack.c.l.b16 %v8170
  %v8352 = vunpack.c.l.b16 %v8171
  %v8353 = vunpack.c.l.b16 %v8172
  %v8354 = vunpack.c.l.b16 %v8173
  %v8355 = vunpack.c.l.b16 %v8174
  %v8356 = vunpack.c.l.b16 %v8175
  %v8357 = vunpack.c.l.b16 %v8176
  %v8358 = vunpack.c.l.b16 %v8177
  %v8359 = vunpack.c.l.b16 %v8178
  %v8360 = vunpack.c.l.b16 %v8179
  %v8361 = vunpack.c.l.b16 %v8180
  %v8362 = vunpack.c.l.b16 %v8181
  %v8363 = vunpack.c.l.b16 %v8182
  %v8364 = vunpack.c.l.b16 %v8183
  %v8365 = vunpack.c.l.b16 %v8184
  %v8366 = vunpack.c.l.b16 %v8185
  %v8367 = vunpack.c.l.b16 %v8186
  %v8368 = vunpack.c.l.b16 %v8187
  %v8369 = vunpack.c.l.b16 %v8188
  %v8370 = vunpack.c.l.b16 %v8189
  %v8371 = vunpack.c.l.b16 %v8190
  %v8372 = vunpack.c.l.b16 %v8191
  %v8373 = vunpack.c.l.b16 %v8192
  %v8374 = vunpack.c.l.b16 %v8193
  %v8375 = vpack.c.b16 %v8328, %v8327
  %v8376 = vpack.c.b16 %v8330, %v8329
  %v8377 = vpack.c.b16 %v8332, %v8331
  %v8378 = vpack.c.b16 %v8334, %v8333
  %v8379 = vpack.c.b16 %v8336, %v8335
  %v8380 = vpack.c.b16 %v8338, %v8337
  %v8381 = vpack.c.b16 %v8340, %v8339
  %v8382 = vpack.c.b16 %v8342, %v8341
  %v8383 = vpack.c.b16 %v8344, %v8343
  %v8384 = vpack.c.b16 %v8346, %v8345
  %v8385 = vpack.c.b16 %v8348, %v8347
  %v8386 = vpack.c.b16 %v8350, %v8349
  %v8387 = vpack.c.b16 %v8352, %v8351
  %v8388 = vpack.c.b16 %v8354, %v8353
  %v8389 = vpack.c.b16 %v8356, %v8355
  %v8390 = vpack.c.b16 %v8358, %v8357
  %v8391 = vpack.c.b16 %v8360, %v8359
  %v8392 = vpack.c.b16 %v8362, %v8361
  %v8393 = vpack.c.b16 %v8364, %v8363
  %v8394 = vpack.c.b16 %v8366, %v8365
  %v8395 = vpack.c.b16 %v8368, %v8367
  %v8396 = vpack.c.b16 %v8370, %v8369
  %v8397 = vpack.c.b16 %v8372, %v8371
  %v8398 = vpack.c.b16 %v8374, %v8373
  %8423 = vmatprep.subr.bf16.mxu0 0
  %8424 = vmatpush1.bf16.msra.mxu0 %v8382
  %8425 = vmatprep.subr.bf16.mxu0 0
  %8426 = vmatpush1.bf16.msra.mxu0 %v8381
  %8427 = vmatprep.subr.bf16.mxu0 0
  %8428 = vmatpush1.bf16.msra.mxu0 %v8380
  %8429 = vmatprep.subr.bf16.mxu0 0
  %8430 = vmatpush1.bf16.msra.mxu0 %v8379
  %8431 = vmatprep.subr.bf16.mxu0 0
  %8432 = vmatpush1.bf16.msra.mxu0 %v8378
  %8433 = vmatprep.subr.bf16.mxu0 0
  %8434 = vmatpush1.bf16.msra.mxu0 %v8377
  %8435 = vmatprep.subr.bf16.mxu0 0
  %8436 = vmatpush1.bf16.msra.mxu0 %v8376
  %8437 = vmatprep.subr.bf16.mxu0 0
  %8438 = vmatpush1.bf16.msra.mxu0 %v8375
  %8439 = vmatprep.subr.bf16.mxu0 0
  %8440 = vmatpush2.bf16.msra.mxu0 %v8390
  %8441 = vmatprep.subr.bf16.mxu0 0
  %8442 = vmatpush2.bf16.msra.mxu0 %v8389
  %8443 = vmatprep.subr.bf16.mxu0 0
  %8444 = vmatpush2.bf16.msra.mxu0 %v8388
  %8445 = vmatprep.subr.bf16.mxu0 0
  %8446 = vmatpush2.bf16.msra.mxu0 %v8387
  %8447 = vmatprep.subr.bf16.mxu0 0
  %8448 = vmatpush2.bf16.msra.mxu0 %v8386
  %8449 = vmatprep.subr.bf16.mxu0 0
  %8450 = vmatpush2.bf16.msra.mxu0 %v8385
  %8451 = vmatprep.subr.bf16.mxu0 0
  %8452 = vmatpush2.bf16.msra.mxu0 %v8384
  %8453 = vmatprep.subr.bf16.mxu0 0
  %8454 = vmatpush2.bf16.msra.mxu0 %v8383
  %8455 = vmatprep.mubr.bf16.mxu0 %v8274
  %8456 = vmatmul.mubr.bf16.gmra.mxu0 %v8273
  %v8457 = vpop.f32.mrf.mxu0
  %v8458 = vadd.f32 0.0, %v8457
  %v8459 = vpop.f32.mrf.mxu0
  %v8460 = vpop.f32.mrf.mxu0
  %v8461 = vadd.f32 0.0, %v8460
  %v8462 = vpop.f32.mrf.mxu0
  %8463 = vmatprep.mubr.bf16.mxu0 %v8277
  %8464 = vmatmul.mubr.bf16.gmra.mxu0 %v8276
  %v8465 = vpop.f32.mrf.mxu0
  %v8466 = vadd.f32 0.0, %v8465
  %v8467 = vpop.f32.mrf.mxu0
  %v8468 = vpop.f32.mrf.mxu0
  %v8469 = vadd.f32 0.0, %v8468
  %v8470 = vpop.f32.mrf.mxu0
  %8471 = vdwg.mxu0
  %8472 = vmatprep.subr.bf16.mxu0 0
  %8473 = vmatpush1.bf16.msra.mxu0 %v8398
  %8474 = vmatprep.subr.bf16.mxu0 0
  %8475 = vmatpush1.bf16.msra.mxu0 %v8397
  %8476 = vmatprep.subr.bf16.mxu0 0
  %8477 = vmatpush1.bf16.msra.mxu0 %v8396
  %8478 = vmatprep.subr.bf16.mxu0 0
  %8479 = vmatpush1.bf16.msra.mxu0 %v8395
  %8480 = vmatprep.subr.bf16.mxu0 0
  %8481 = vmatpush1.bf16.msra.mxu0 %v8394
  %8482 = vmatprep.subr.bf16.mxu0 0
  %8483 = vmatpush1.bf16.msra.mxu0 %v8393
  %8484 = vmatprep.subr.bf16.mxu0 0
  %8485 = vmatpush1.bf16.msra.mxu0 %v8392
  %8486 = vmatprep.subr.bf16.mxu0 0
  %8487 = vmatpush1.bf16.msra.mxu0 %v8391
  %8488 = vmatprep.subr.bf16.mxu0 0
  %8489 = vmatpush2.bf16.msra.mxu0 0
  %8490 = vmatprep.subr.bf16.mxu0 0
  %8491 = vmatpush2.bf16.msra.mxu0 0
  %8492 = vmatprep.subr.bf16.mxu0 0
  %8493 = vmatpush2.bf16.msra.mxu0 0
  %8494 = vmatprep.subr.bf16.mxu0 0
  %8495 = vmatpush2.bf16.msra.mxu0 0
  %8496 = vmatprep.subr.bf16.mxu0 0
  %8497 = vmatpush2.bf16.msra.mxu0 0
  %8498 = vmatprep.subr.bf16.mxu0 0
  %8499 = vmatpush2.bf16.msra.mxu0 0
  %8500 = vmatprep.subr.bf16.mxu0 0
  %8501 = vmatpush2.bf16.msra.mxu0 0
  %8502 = vmatprep.subr.bf16.mxu0 0
  %8503 = vmatpush2.bf16.msra.mxu0 0
  %8504 = vmatprep.mubr.bf16.mxu0 0
  %8505 = vmatmul.mubr.bf16.gmra.mxu0 %v8275
  %v8506 = vpop.f32.mrf.mxu0
  %v8507 = vadd.f32 %v8458, %v8506
  %v8508 = vpop.f32.mrf.mxu0
  %v8509 = vpop.f32.mrf.mxu0
  %v8510 = vadd.f32 %v8461, %v8509
  %v8511 = vpop.f32.mrf.mxu0
  %8512 = vmatprep.mubr.bf16.mxu0 0
  %8513 = vmatmul.mubr.bf16.gmra.mxu0 %v8278
  %v8514 = vpop.f32.mrf.mxu0
  %v8515 = vadd.f32 %v8466, %v8514
  %v8516 = vpop.f32.mrf.mxu0
  %v8517 = vpop.f32.mrf.mxu0
  %v8518 = vadd.f32 %v8469, %v8517
  %v8519 = vpop.f32.mrf.mxu0
  %8520 = vdwg.mxu0
  %8521 = vmatprep.subr.bf16.mxu0 0
  %8522 = vmatpush1.bf16.msra.mxu0 %v8382
  %8523 = vmatprep.subr.bf16.mxu0 0
  %8524 = vmatpush1.bf16.msra.mxu0 %v8381
  %8525 = vmatprep.subr.bf16.mxu0 0
  %8526 = vmatpush1.bf16.msra.mxu0 %v8380
  %8527 = vmatprep.subr.bf16.mxu0 0
  %8528 = vmatpush1.bf16.msra.mxu0 %v8379
  %8529 = vmatprep.subr.bf16.mxu0 0
  %8530 = vmatpush1.bf16.msra.mxu0 %v8378
  %8531 = vmatprep.subr.bf16.mxu0 0
  %8532 = vmatpush1.bf16.msra.mxu0 %v8377
  %8533 = vmatprep.subr.bf16.mxu0 0
  %8534 = vmatpush1.bf16.msra.mxu0 %v8376
  %8535 = vmatprep.subr.bf16.mxu0 0
  %8536 = vmatpush1.bf16.msra.mxu0 %v8375
  %8537 = vmatprep.subr.bf16.mxu0 0
  %8538 = vmatpush2.bf16.msra.mxu0 %v8390
  %8539 = vmatprep.subr.bf16.mxu0 0
  %8540 = vmatpush2.bf16.msra.mxu0 %v8389
  %8541 = vmatprep.subr.bf16.mxu0 0
  %8542 = vmatpush2.bf16.msra.mxu0 %v8388
  %8543 = vmatprep.subr.bf16.mxu0 0
  %8544 = vmatpush2.bf16.msra.mxu0 %v8387
  %8545 = vmatprep.subr.bf16.mxu0 0
  %8546 = vmatpush2.bf16.msra.mxu0 %v8386
  %8547 = vmatprep.subr.bf16.mxu0 0
  %8548 = vmatpush2.bf16.msra.mxu0 %v8385
  %8549 = vmatprep.subr.bf16.mxu0 0
  %8550 = vmatpush2.bf16.msra.mxu0 %v8384
  %8551 = vmatprep.subr.bf16.mxu0 0
  %8552 = vmatpush2.bf16.msra.mxu0 %v8383
  %8553 = vmatprep.mubr.bf16.mxu0 %v8244
  %8554 = vmatmul.mubr.bf16.gmra.mxu0 %v8243
  %v8555 = vpop.f32.mrf.mxu0
  %v8556 = vadd.f32 %v8507, %v8555
  %v8557 = vpop.f32.mrf.mxu0
  %v8558 = vpop.f32.mrf.mxu0
  %v8559 = vadd.f32 %v8510, %v8558
  %v8560 = vpop.f32.mrf.mxu0
  %8561 = vmatprep.mubr.bf16.mxu0 %v8247
  %8562 = vmatmul.mubr.bf16.gmra.mxu0 %v8246
  %v8563 = vpop.f32.mrf.mxu0
  %v8564 = vadd.f32 %v8515, %v8563
  %v8565 = vpop.f32.mrf.mxu0
  %v8566 = vpop.f32.mrf.mxu0
  %v8567 = vadd.f32 %v8518, %v8566
  %v8568 = vpop.f32.mrf.mxu0
  %8569 = vdwg.mxu0
  %8570 = vmatprep.subr.bf16.mxu0 0
  %8571 = vmatpush1.bf16.msra.mxu0 %v8398
  %8572 = vmatprep.subr.bf16.mxu0 0
  %8573 = vmatpush1.bf16.msra.mxu0 %v8397
  %8574 = vmatprep.subr.bf16.mxu0 0
  %8575 = vmatpush1.bf16.msra.mxu0 %v8396
  %8576 = vmatprep.subr.bf16.mxu0 0
  %8577 = vmatpush1.bf16.msra.mxu0 %v8395
  %8578 = vmatprep.subr.bf16.mxu0 0
  %8579 = vmatpush1.bf16.msra.mxu0 %v8394
  %8580 = vmatprep.subr.bf16.mxu0 0
  %8581 = vmatpush1.bf16.msra.mxu0 %v8393
  %8582 = vmatprep.subr.bf16.mxu0 0
  %8583 = vmatpush1.bf16.msra.mxu0 %v8392
  %8584 = vmatprep.subr.bf16.mxu0 0
  %8585 = vmatpush1.bf16.msra.mxu0 %v8391
  %8586 = vmatprep.subr.bf16.mxu0 0
  %8587 = vmatpush2.bf16.msra.mxu0 0
  %8588 = vmatprep.subr.bf16.mxu0 0
  %8589 = vmatpush2.bf16.msra.mxu0 0
  %8590 = vmatprep.subr.bf16.mxu0 0
  %8591 = vmatpush2.bf16.msra.mxu0 0
  %8592 = vmatprep.subr.bf16.mxu0 0
  %8593 = vmatpush2.bf16.msra.mxu0 0
  %8594 = vmatprep.subr.bf16.mxu0 0
  %8595 = vmatpush2.bf16.msra.mxu0 0
  %8596 = vmatprep.subr.bf16.mxu0 0
  %8597 = vmatpush2.bf16.msra.mxu0 0
  %8598 = vmatprep.subr.bf16.mxu0 0
  %8599 = vmatpush2.bf16.msra.mxu0 0
  %8600 = vmatprep.subr.bf16.mxu0 0
  %8601 = vmatpush2.bf16.msra.mxu0 0
  %8602 = vmatprep.mubr.bf16.mxu0 0
  %8603 = vmatmul.mubr.bf16.gmra.mxu0 %v8245
  %v8604 = vpop.f32.mrf.mxu0
  %v8605 = vadd.f32 %v8556, %v8604
  %v8606 = vpop.f32.mrf.mxu0
  %v8607 = vpop.f32.mrf.mxu0
  %v8608 = vadd.f32 %v8559, %v8607
  %v8609 = vpop.f32.mrf.mxu0
  %8610 = vmatprep.mubr.bf16.mxu0 0
  %8611 = vmatmul.mubr.bf16.gmra.mxu0 %v8248
  %v8612 = vpop.f32.mrf.mxu0
  %v8613 = vadd.f32 %v8564, %v8612
  %v8614 = vpop.f32.mrf.mxu0
  %v8615 = vpop.f32.mrf.mxu0
  %v8616 = vadd.f32 %v8567, %v8615
  %v8617 = vpop.f32.mrf.mxu0
  %8618 = vdwg.mxu0
  %v8667 = vunpack.c.l.b16 %v8195
  %v8668 = vunpack.c.l.b16 %v8196
  %v8669 = vunpack.c.l.b16 %v8197
  %v8670 = vunpack.c.l.b16 %v8198
  %v8671 = vunpack.c.l.b16 %v8199
  %v8672 = vunpack.c.l.b16 %v8200
  %v8673 = vunpack.c.l.b16 %v8201
  %v8674 = vunpack.c.l.b16 %v8202
  %v8675 = vunpack.c.l.b16 %v8203
  %v8676 = vunpack.c.l.b16 %v8204
  %v8677 = vunpack.c.l.b16 %v8205
  %v8678 = vunpack.c.l.b16 %v8206
  %v8679 = vunpack.c.l.b16 %v8207
  %v8680 = vunpack.c.l.b16 %v8208
  %v8681 = vunpack.c.l.b16 %v8209
  %v8682 = vunpack.c.l.b16 %v8210
  %v8683 = vunpack.c.l.b16 %v8211
  %v8684 = vunpack.c.l.b16 %v8212
  %v8685 = vunpack.c.l.b16 %v8213
  %v8686 = vunpack.c.l.b16 %v8214
  %v8687 = vunpack.c.l.b16 %v8215
  %v8688 = vunpack.c.l.b16 %v8216
  %v8689 = vunpack.c.l.b16 %v8217
  %v8690 = vunpack.c.l.b16 %v8218
  %v8691 = vunpack.c.l.b16 %v8219
  %v8692 = vunpack.c.l.b16 %v8220
  %v8693 = vunpack.c.l.b16 %v8221
  %v8694 = vunpack.c.l.b16 %v8222
  %v8695 = vunpack.c.l.b16 %v8223
  %v8696 = vunpack.c.l.b16 %v8224
  %v8697 = vunpack.c.l.b16 %v8225
  %v8698 = vunpack.c.l.b16 %v8226
  %v8699 = vunpack.c.l.b16 %v8227
  %v8700 = vunpack.c.l.b16 %v8228
  %v8701 = vunpack.c.l.b16 %v8229
  %v8702 = vunpack.c.l.b16 %v8230
  %v8703 = vunpack.c.l.b16 %v8231
  %v8704 = vunpack.c.l.b16 %v8232
  %v8705 = vunpack.c.l.b16 %v8233
  %v8706 = vunpack.c.l.b16 %v8234
  %v8707 = vunpack.c.l.b16 %v8235
  %v8708 = vunpack.c.l.b16 %v8236
  %v8709 = vunpack.c.l.b16 %v8237
  %v8710 = vunpack.c.l.b16 %v8238
  %v8711 = vunpack.c.l.b16 %v8239
  %v8712 = vunpack.c.l.b16 %v8240
  %v8713 = vunpack.c.l.b16 %v8241
  %v8714 = vunpack.c.l.b16 %v8242
  %v8715 = vpack.c.b16 %v8668, %v8667
  %v8716 = vpack.c.b16 %v8670, %v8669
  %v8717 = vpack.c.b16 %v8672, %v8671
  %v8718 = vpack.c.b16 %v8674, %v8673
  %v8719 = vpack.c.b16 %v8676, %v8675
  %v8720 = vpack.c.b16 %v8678, %v8677
  %v8721 = vpack.c.b16 %v8680, %v8679
  %v8722 = vpack.c.b16 %v8682, %v8681
  %v8723 = vpack.c.b16 %v8684, %v8683
  %v8724 = vpack.c.b16 %v8686, %v8685
  %v8725 = vpack.c.b16 %v8688, %v8687
  %v8726 = vpack.c.b16 %v8690, %v8689
  %v8727 = vpack.c.b16 %v8692, %v8691
  %v8728 = vpack.c.b16 %v8694, %v8693
  %v8729 = vpack.c.b16 %v8696, %v8695
  %v8730 = vpack.c.b16 %v8698, %v8697
  %v8731 = vpack.c.b16 %v8700, %v8699
  %v8732 = vpack.c.b16 %v8702, %v8701
  %v8733 = vpack.c.b16 %v8704, %v8703
  %v8734 = vpack.c.b16 %v8706, %v8705
  %v8735 = vpack.c.b16 %v8708, %v8707
  %v8736 = vpack.c.b16 %v8710, %v8709
  %v8737 = vpack.c.b16 %v8712, %v8711
  %v8738 = vpack.c.b16 %v8714, %v8713
  %8763 = vmatprep.subr.bf16.mxu0 0
  %8764 = vmatpush1.bf16.msra.mxu0 %v8722
  %8765 = vmatprep.subr.bf16.mxu0 0
  %8766 = vmatpush1.bf16.msra.mxu0 %v8721
  %8767 = vmatprep.subr.bf16.mxu0 0
  %8768 = vmatpush1.bf16.msra.mxu0 %v8720
  %8769 = vmatprep.subr.bf16.mxu0 0
  %8770 = vmatpush1.bf16.msra.mxu0 %v8719
  %8771 = vmatprep.subr.bf16.mxu0 0
  %8772 = vmatpush1.bf16.msra.mxu0 %v8718
  %8773 = vmatprep.subr.bf16.mxu0 0
  %8774 = vmatpush1.bf16.msra.mxu0 %v8717
  %8775 = vmatprep.subr.bf16.mxu0 0
  %8776 = vmatpush1.bf16.msra.mxu0 %v8716
  %8777 = vmatprep.subr.bf16.mxu0 0
  %8778 = vmatpush1.bf16.msra.mxu0 %v8715
  %8779 = vmatprep.subr.bf16.mxu0 0
  %8780 = vmatpush2.bf16.msra.mxu0 %v8730
  %8781 = vmatprep.subr.bf16.mxu0 0
  %8782 = vmatpush2.bf16.msra.mxu0 %v8729
  %8783 = vmatprep.subr.bf16.mxu0 0
  %8784 = vmatpush2.bf16.msra.mxu0 %v8728
  %8785 = vmatprep.subr.bf16.mxu0 0
  %8786 = vmatpush2.bf16.msra.mxu0 %v8727
  %8787 = vmatprep.subr.bf16.mxu0 0
  %8788 = vmatpush2.bf16.msra.mxu0 %v8726
  %8789 = vmatprep.subr.bf16.mxu0 0
  %8790 = vmatpush2.bf16.msra.mxu0 %v8725
  %8791 = vmatprep.subr.bf16.mxu0 0
  %8792 = vmatpush2.bf16.msra.mxu0 %v8724
  %8793 = vmatprep.subr.bf16.mxu0 0
  %8794 = vmatpush2.bf16.msra.mxu0 %v8723
  %8795 = vmatprep.mubr.bf16.mxu0 %v8244
  %8796 = vmatmul.mubr.bf16.gmra.mxu0 %v8243
  %v8797 = vpop.f32.mrf.mxu0
  %v8798 = vadd.f32 0.0, %v8797
  %v8799 = vpop.f32.mrf.mxu0
  %v8800 = vpop.f32.mrf.mxu0
  %v8801 = vadd.f32 0.0, %v8800
  %v8802 = vpop.f32.mrf.mxu0
  %8803 = vmatprep.mubr.bf16.mxu0 %v8247
  %8804 = vmatmul.mubr.bf16.gmra.mxu0 %v8246
  %v8805 = vpop.f32.mrf.mxu0
  %v8806 = vadd.f32 0.0, %v8805
  %v8807 = vpop.f32.mrf.mxu0
  %v8808 = vpop.f32.mrf.mxu0
  %v8809 = vadd.f32 0.0, %v8808
  %v8810 = vpop.f32.mrf.mxu0
  %8811 = vdwg.mxu0
  %8812 = vmatprep.subr.bf16.mxu0 0
  %8813 = vmatpush1.bf16.msra.mxu0 %v8738
  %8814 = vmatprep.subr.bf16.mxu0 0
  %8815 = vmatpush1.bf16.msra.mxu0 %v8737
  %8816 = vmatprep.subr.bf16.mxu0 0
  %8817 = vmatpush1.bf16.msra.mxu0 %v8736
  %8818 = vmatprep.subr.bf16.mxu0 0
  %8819 = vmatpush1.bf16.msra.mxu0 %v8735
  %8820 = vmatprep.subr.bf16.mxu0 0
  %8821 = vmatpush1.bf16.msra.mxu0 %v8734
  %8822 = vmatprep.subr.bf16.mxu0 0
  %8823 = vmatpush1.bf16.msra.mxu0 %v8733
  %8824 = vmatprep.subr.bf16.mxu0 0
  %8825 = vmatpush1.bf16.msra.mxu0 %v8732
  %8826 = vmatprep.subr.bf16.mxu0 0
  %8827 = vmatpush1.bf16.msra.mxu0 %v8731
  %8828 = vmatprep.subr.bf16.mxu0 0
  %8829 = vmatpush2.bf16.msra.mxu0 0
  %8830 = vmatprep.subr.bf16.mxu0 0
  %8831 = vmatpush2.bf16.msra.mxu0 0
  %8832 = vmatprep.subr.bf16.mxu0 0
  %8833 = vmatpush2.bf16.msra.mxu0 0
  %8834 = vmatprep.subr.bf16.mxu0 0
  %8835 = vmatpush2.bf16.msra.mxu0 0
  %8836 = vmatprep.subr.bf16.mxu0 0
  %8837 = vmatpush2.bf16.msra.mxu0 0
  %8838 = vmatprep.subr.bf16.mxu0 0
  %8839 = vmatpush2.bf16.msra.mxu0 0
  %8840 = vmatprep.subr.bf16.mxu0 0
  %8841 = vmatpush2.bf16.msra.mxu0 0
  %8842 = vmatprep.subr.bf16.mxu0 0
  %8843 = vmatpush2.bf16.msra.mxu0 0
  %8844 = vmatprep.mubr.bf16.mxu0 0
  %8845 = vmatmul.mubr.bf16.gmra.mxu0 %v8245
  %v8846 = vpop.f32.mrf.mxu0
  %v8847 = vadd.f32 %v8798, %v8846
  %v8848 = vpop.f32.mrf.mxu0
  %v8849 = vpop.f32.mrf.mxu0
  %v8850 = vadd.f32 %v8801, %v8849
  %v8851 = vpop.f32.mrf.mxu0
  %8852 = vmatprep.mubr.bf16.mxu0 0
  %8853 = vmatmul.mubr.bf16.gmra.mxu0 %v8248
  %v8854 = vpop.f32.mrf.mxu0
  %v8855 = vadd.f32 %v8806, %v8854
  %v8856 = vpop.f32.mrf.mxu0
  %v8857 = vpop.f32.mrf.mxu0
  %v8858 = vadd.f32 %v8809, %v8857
  %v8859 = vpop.f32.mrf.mxu0
  %8860 = vdwg.mxu0
  %v8861 = vadd.f32 %v8605, %v8847
  %v8862 = vadd.f32 %v8608, %v8850
  %v8863 = vadd.f32 %v8613, %v8855
  %v8864 = vadd.f32 %v8616, %v8858
  %v8865 = vadd.f32 %v8129, %v8861
  %v8866 = vadd.f32 %v8130, %v8862
  %v8867 = vadd.f32 %v8131, %v8863
  %v8868 = vadd.f32 %v8132, %v8864
  %v8869 = vld [vmem:[#allocation2 + $0x78] sm:$0xff]
  %v8870 = vld [vmem:[#allocation2 + $0x80] sm:$0xff]
  %v8871 = vld [vmem:[#allocation2 + $0x88] sm:$0xff]
  %v8872 = vld [vmem:[#allocation2 + $0x90] sm:$0xff]
  %v8873 = vld [vmem:[#allocation2 + $0x98] sm:$0xff]
  %v8874 = vld [vmem:[#allocation2 + $0xa0] sm:$0xff]
  %v8875 = vld [vmem:[#allocation2 + $0xa8] sm:$0xff]
  %v8876 = vld [vmem:[#allocation2 + $0xb0] sm:$0xff]
  %v8877 = vld [vmem:[#allocation2 + $0xb8] sm:$0xff]
  %v8878 = vld [vmem:[#allocation2 + $0xc0] sm:$0xff]
  %v8879 = vld [vmem:[#allocation2 + $0xc8] sm:$0xff]
  %v8880 = vld [vmem:[#allocation2 + $0xd0] sm:$0xff]
  %s8881 = scalar_lea.vmem %s5, 960
  %v8882 = vld [vmem:[%s8881] sm:$0xf]
  %v8883 = vld [vmem:[%s8881 + $0x4] sm:$0xf]
  %v8884 = vld [vmem:[%s8881 + $0x8] sm:$0xf]
  %v8885 = vld [vmem:[%s8881 + $0xc] sm:$0xf]
  %v8886 = vld [vmem:[%s8881 + $0x10] sm:$0xf]
  %v8887 = vld [vmem:[%s8881 + $0x14] sm:$0xf]
  %v8888 = vld [vmem:[%s8881 + $0x18] sm:$0xf]
  %v8889 = vld [vmem:[%s8881 + $0x1c] sm:$0xf]
  %v8890 = vld [vmem:[%s8881 + $0x20] sm:$0xf]
  %v8891 = vld [vmem:[%s8881 + $0x24] sm:$0xf]
  %v8892 = vld [vmem:[%s8881 + $0x28] sm:$0xf]
  %v8893 = vld [vmem:[%s8881 + $0x2c] sm:$0xf]
  %v8894 = vld [vmem:[%s8881 + $0x30] sm:$0xf]
  %v8895 = vld [vmem:[%s8881 + $0x34] sm:$0xf]
  %v8896 = vld [vmem:[%s8881 + $0x38] sm:$0xf]
  %v8897 = vld [vmem:[%s8881 + $0x3c] sm:$0xf]
  %v8898 = vld [vmem:[%s8881 + $0x40] sm:$0xf]
  %v8899 = vld [vmem:[%s8881 + $0x44] sm:$0xf]
  %v8900 = vld [vmem:[%s8881 + $0x48] sm:$0xf]
  %v8901 = vld [vmem:[%s8881 + $0x4c] sm:$0xf]
  %v8902 = vld [vmem:[%s8881 + $0x50] sm:$0xf]
  %v8903 = vld [vmem:[%s8881 + $0x54] sm:$0xf]
  %v8904 = vld [vmem:[%s8881 + $0x58] sm:$0xf]
  %v8905 = vld [vmem:[%s8881 + $0x5c] sm:$0xf]
  %v8906 = vld [vmem:[%s8881 + $0x60] sm:$0xf]
  %v8907 = vld [vmem:[%s8881 + $0x64] sm:$0xf]
  %v8908 = vld [vmem:[%s8881 + $0x68] sm:$0xf]
  %v8909 = vld [vmem:[%s8881 + $0x6c] sm:$0xf]
  %v8910 = vld [vmem:[%s8881 + $0x70] sm:$0xf]
  %v8911 = vld [vmem:[%s8881 + $0x74] sm:$0xf]
  %v8912 = vld [vmem:[%s8881 + $0x78] sm:$0xf]
  %v8913 = vld [vmem:[%s8881 + $0x7c] sm:$0xf]
  %v8914 = vld [vmem:[%s8881 + $0x80] sm:$0xf]
  %v8915 = vld [vmem:[%s8881 + $0x84] sm:$0xf]
  %v8916 = vld [vmem:[%s8881 + $0x88] sm:$0xf]
  %v8917 = vld [vmem:[%s8881 + $0x8c] sm:$0xf]
  %v8918 = vld [vmem:[%s8881 + $0x90] sm:$0xf]
  %v8919 = vld [vmem:[%s8881 + $0x94] sm:$0xf]
  %v8920 = vld [vmem:[%s8881 + $0x98] sm:$0xf]
  %v8921 = vld [vmem:[%s8881 + $0x9c] sm:$0xf]
  %v8922 = vld [vmem:[%s8881 + $0xa0] sm:$0xf]
  %v8923 = vld [vmem:[%s8881 + $0xa4] sm:$0xf]
  %v8924 = vld [vmem:[%s8881 + $0xa8] sm:$0xf]
  %v8925 = vld [vmem:[%s8881 + $0xac] sm:$0xf]
  %v8926 = vld [vmem:[%s8881 + $0xb0] sm:$0xf]
  %v8927 = vld [vmem:[%s8881 + $0xb4] sm:$0xf]
  %v8928 = vld [vmem:[%s8881 + $0xb8] sm:$0xf]
  %v8929 = vld [vmem:[%s8881 + $0xbc] sm:$0xf]
  %s8930 = scalar_lea.vmem %s6, 960
  %v8931 = vld [vmem:[%s8930] sm:$0xf]
  %v8932 = vld [vmem:[%s8930 + $0x4] sm:$0xf]
  %v8933 = vld [vmem:[%s8930 + $0x8] sm:$0xf]
  %v8934 = vld [vmem:[%s8930 + $0xc] sm:$0xf]
  %v8935 = vld [vmem:[%s8930 + $0x10] sm:$0xf]
  %v8936 = vld [vmem:[%s8930 + $0x14] sm:$0xf]
  %v8937 = vld [vmem:[%s8930 + $0x18] sm:$0xf]
  %v8938 = vld [vmem:[%s8930 + $0x1c] sm:$0xf]
  %v8939 = vld [vmem:[%s8930 + $0x20] sm:$0xf]
  %v8940 = vld [vmem:[%s8930 + $0x24] sm:$0xf]
  %v8941 = vld [vmem:[%s8930 + $0x28] sm:$0xf]
  %v8942 = vld [vmem:[%s8930 + $0x2c] sm:$0xf]
  %v8943 = vld [vmem:[%s8930 + $0x30] sm:$0xf]
  %v8944 = vld [vmem:[%s8930 + $0x34] sm:$0xf]
  %v8945 = vld [vmem:[%s8930 + $0x38] sm:$0xf]
  %v8946 = vld [vmem:[%s8930 + $0x3c] sm:$0xf]
  %v8947 = vld [vmem:[%s8930 + $0x40] sm:$0xf]
  %v8948 = vld [vmem:[%s8930 + $0x44] sm:$0xf]
  %v8949 = vld [vmem:[%s8930 + $0x48] sm:$0xf]
  %v8950 = vld [vmem:[%s8930 + $0x4c] sm:$0xf]
  %v8951 = vld [vmem:[%s8930 + $0x50] sm:$0xf]
  %v8952 = vld [vmem:[%s8930 + $0x54] sm:$0xf]
  %v8953 = vld [vmem:[%s8930 + $0x58] sm:$0xf]
  %v8954 = vld [vmem:[%s8930 + $0x5c] sm:$0xf]
  %v8955 = vld [vmem:[%s8930 + $0x60] sm:$0xf]
  %v8956 = vld [vmem:[%s8930 + $0x64] sm:$0xf]
  %v8957 = vld [vmem:[%s8930 + $0x68] sm:$0xf]
  %v8958 = vld [vmem:[%s8930 + $0x6c] sm:$0xf]
  %v8959 = vld [vmem:[%s8930 + $0x70] sm:$0xf]
  %v8960 = vld [vmem:[%s8930 + $0x74] sm:$0xf]
  %v8961 = vld [vmem:[%s8930 + $0x78] sm:$0xf]
  %v8962 = vld [vmem:[%s8930 + $0x7c] sm:$0xf]
  %v8963 = vld [vmem:[%s8930 + $0x80] sm:$0xf]
  %v8964 = vld [vmem:[%s8930 + $0x84] sm:$0xf]
  %v8965 = vld [vmem:[%s8930 + $0x88] sm:$0xf]
  %v8966 = vld [vmem:[%s8930 + $0x8c] sm:$0xf]
  %v8967 = vld [vmem:[%s8930 + $0x90] sm:$0xf]
  %v8968 = vld [vmem:[%s8930 + $0x94] sm:$0xf]
  %v8969 = vld [vmem:[%s8930 + $0x98] sm:$0xf]
  %v8970 = vld [vmem:[%s8930 + $0x9c] sm:$0xf]
  %v8971 = vld [vmem:[%s8930 + $0xa0] sm:$0xf]
  %v8972 = vld [vmem:[%s8930 + $0xa4] sm:$0xf]
  %v8973 = vld [vmem:[%s8930 + $0xa8] sm:$0xf]
  %v8974 = vld [vmem:[%s8930 + $0xac] sm:$0xf]
  %v8975 = vld [vmem:[%s8930 + $0xb0] sm:$0xf]
  %v8976 = vld [vmem:[%s8930 + $0xb4] sm:$0xf]
  %v8977 = vld [vmem:[%s8930 + $0xb8] sm:$0xf]
  %v8978 = vld [vmem:[%s8930 + $0xbc] sm:$0xf]
  %v8979 = vpack.c.bf16 %v8872, %v8869
  %v8980 = vpack.c.bf16 %v8873, %v8870
  %v8981 = vpack.c.bf16 %v8874, %v8871
  %v8982 = vpack.c.bf16 %v8878, %v8875
  %v8983 = vpack.c.bf16 %v8879, %v8876
  %v8984 = vpack.c.bf16 %v8880, %v8877
  %v8985 = vunpack.c.l.bf16 %v8979
  %v8986 = vunpack.c.l.bf16 %v8980
  %v8987 = vunpack.c.l.bf16 %v8981
  %v8988 = vunpack.c.h.bf16 %v8979
  %v8989 = vunpack.c.h.bf16 %v8980
  %v8990 = vunpack.c.h.bf16 %v8981
  %v8991 = vunpack.c.l.bf16 %v8982
  %v8992 = vunpack.c.l.bf16 %v8983
  %v8993 = vunpack.c.l.bf16 %v8984
  %v8994 = vunpack.c.h.bf16 %v8982
  %v8995 = vunpack.c.h.bf16 %v8983
  %v8996 = vunpack.c.h.bf16 %v8984
  %v8997 = vsub.f32 %v8869, %v8985
  %v8998 = vsub.f32 %v8870, %v8986
  %v8999 = vsub.f32 %v8871, %v8987
  %v9000 = vsub.f32 %v8872, %v8988
  %v9001 = vsub.f32 %v8873, %v8989
  %v9002 = vsub.f32 %v8874, %v8990
  %v9003 = vsub.f32 %v8875, %v8991
  %v9004 = vsub.f32 %v8876, %v8992
  %v9005 = vsub.f32 %v8877, %v8993
  %v9006 = vsub.f32 %v8878, %v8994
  %v9007 = vsub.f32 %v8879, %v8995
  %v9008 = vsub.f32 %v8880, %v8996
  %v9009 = vpack.c.bf16 %v9000, %v8997
  %v9010 = vpack.c.bf16 %v9001, %v8998
  %v9011 = vpack.c.bf16 %v9002, %v8999
  %v9012 = vpack.c.bf16 %v9006, %v9003
  %v9013 = vpack.c.bf16 %v9007, %v9004
  %v9014 = vpack.c.bf16 %v9008, %v9005
  %v9063 = vunpack.c.l.b16 %v8882
  %v9064 = vunpack.c.l.b16 %v8883
  %v9065 = vunpack.c.l.b16 %v8884
  %v9066 = vunpack.c.l.b16 %v8885
  %v9067 = vunpack.c.l.b16 %v8886
  %v9068 = vunpack.c.l.b16 %v8887
  %v9069 = vunpack.c.l.b16 %v8888
  %v9070 = vunpack.c.l.b16 %v8889
  %v9071 = vunpack.c.l.b16 %v8890
  %v9072 = vunpack.c.l.b16 %v8891
  %v9073 = vunpack.c.l.b16 %v8892
  %v9074 = vunpack.c.l.b16 %v8893
  %v9075 = vunpack.c.l.b16 %v8894
  %v9076 = vunpack.c.l.b16 %v8895
  %v9077 = vunpack.c.l.b16 %v8896
  %v9078 = vunpack.c.l.b16 %v8897
  %v9079 = vunpack.c.l.b16 %v8898
  %v9080 = vunpack.c.l.b16 %v8899
  %v9081 = vunpack.c.l.b16 %v8900
  %v9082 = vunpack.c.l.b16 %v8901
  %v9083 = vunpack.c.l.b16 %v8902
  %v9084 = vunpack.c.l.b16 %v8903
  %v9085 = vunpack.c.l.b16 %v8904
  %v9086 = vunpack.c.l.b16 %v8905
  %v9087 = vunpack.c.l.b16 %v8906
  %v9088 = vunpack.c.l.b16 %v8907
  %v9089 = vunpack.c.l.b16 %v8908
  %v9090 = vunpack.c.l.b16 %v8909
  %v9091 = vunpack.c.l.b16 %v8910
  %v9092 = vunpack.c.l.b16 %v8911
  %v9093 = vunpack.c.l.b16 %v8912
  %v9094 = vunpack.c.l.b16 %v8913
  %v9095 = vunpack.c.l.b16 %v8914
  %v9096 = vunpack.c.l.b16 %v8915
  %v9097 = vunpack.c.l.b16 %v8916
  %v9098 = vunpack.c.l.b16 %v8917
  %v9099 = vunpack.c.l.b16 %v8918
  %v9100 = vunpack.c.l.b16 %v8919
  %v9101 = vunpack.c.l.b16 %v8920
  %v9102 = vunpack.c.l.b16 %v8921
  %v9103 = vunpack.c.l.b16 %v8922
  %v9104 = vunpack.c.l.b16 %v8923
  %v9105 = vunpack.c.l.b16 %v8924
  %v9106 = vunpack.c.l.b16 %v8925
  %v9107 = vunpack.c.l.b16 %v8926
  %v9108 = vunpack.c.l.b16 %v8927
  %v9109 = vunpack.c.l.b16 %v8928
  %v9110 = vunpack.c.l.b16 %v8929
  %v9111 = vpack.c.b16 %v9064, %v9063
  %v9112 = vpack.c.b16 %v9066, %v9065
  %v9113 = vpack.c.b16 %v9068, %v9067
  %v9114 = vpack.c.b16 %v9070, %v9069
  %v9115 = vpack.c.b16 %v9072, %v9071
  %v9116 = vpack.c.b16 %v9074, %v9073
  %v9117 = vpack.c.b16 %v9076, %v9075
  %v9118 = vpack.c.b16 %v9078, %v9077
  %v9119 = vpack.c.b16 %v9080, %v9079
  %v9120 = vpack.c.b16 %v9082, %v9081
  %v9121 = vpack.c.b16 %v9084, %v9083
  %v9122 = vpack.c.b16 %v9086, %v9085
  %v9123 = vpack.c.b16 %v9088, %v9087
  %v9124 = vpack.c.b16 %v9090, %v9089
  %v9125 = vpack.c.b16 %v9092, %v9091
  %v9126 = vpack.c.b16 %v9094, %v9093
  %v9127 = vpack.c.b16 %v9096, %v9095
  %v9128 = vpack.c.b16 %v9098, %v9097
  %v9129 = vpack.c.b16 %v9100, %v9099
  %v9130 = vpack.c.b16 %v9102, %v9101
  %v9131 = vpack.c.b16 %v9104, %v9103
  %v9132 = vpack.c.b16 %v9106, %v9105
  %v9133 = vpack.c.b16 %v9108, %v9107
  %v9134 = vpack.c.b16 %v9110, %v9109
  %9159 = vmatprep.subr.bf16.mxu0 0
  %9160 = vmatpush1.bf16.msra.mxu0 %v9118
  %9161 = vmatprep.subr.bf16.mxu0 0
  %9162 = vmatpush1.bf16.msra.mxu0 %v9117
  %9163 = vmatprep.subr.bf16.mxu0 0
  %9164 = vmatpush1.bf16.msra.mxu0 %v9116
  %9165 = vmatprep.subr.bf16.mxu0 0
  %9166 = vmatpush1.bf16.msra.mxu0 %v9115
  %9167 = vmatprep.subr.bf16.mxu0 0
  %9168 = vmatpush1.bf16.msra.mxu0 %v9114
  %9169 = vmatprep.subr.bf16.mxu0 0
  %9170 = vmatpush1.bf16.msra.mxu0 %v9113
  %9171 = vmatprep.subr.bf16.mxu0 0
  %9172 = vmatpush1.bf16.msra.mxu0 %v9112
  %9173 = vmatprep.subr.bf16.mxu0 0
  %9174 = vmatpush1.bf16.msra.mxu0 %v9111
  %9175 = vmatprep.subr.bf16.mxu0 0
  %9176 = vmatpush2.bf16.msra.mxu0 %v9126
  %9177 = vmatprep.subr.bf16.mxu0 0
  %9178 = vmatpush2.bf16.msra.mxu0 %v9125
  %9179 = vmatprep.subr.bf16.mxu0 0
  %9180 = vmatpush2.bf16.msra.mxu0 %v9124
  %9181 = vmatprep.subr.bf16.mxu0 0
  %9182 = vmatpush2.bf16.msra.mxu0 %v9123
  %9183 = vmatprep.subr.bf16.mxu0 0
  %9184 = vmatpush2.bf16.msra.mxu0 %v9122
  %9185 = vmatprep.subr.bf16.mxu0 0
  %9186 = vmatpush2.bf16.msra.mxu0 %v9121
  %9187 = vmatprep.subr.bf16.mxu0 0
  %9188 = vmatpush2.bf16.msra.mxu0 %v9120
  %9189 = vmatprep.subr.bf16.mxu0 0
  %9190 = vmatpush2.bf16.msra.mxu0 %v9119
  %9191 = vmatprep.mubr.bf16.mxu0 %v9010
  %9192 = vmatmul.mubr.bf16.gmra.mxu0 %v9009
  %v9193 = vpop.f32.mrf.mxu0
  %v9194 = vadd.f32 0.0, %v9193
  %v9195 = vpop.f32.mrf.mxu0
  %v9196 = vpop.f32.mrf.mxu0
  %v9197 = vadd.f32 0.0, %v9196
  %v9198 = vpop.f32.mrf.mxu0
  %9199 = vmatprep.mubr.bf16.mxu0 %v9013
  %9200 = vmatmul.mubr.bf16.gmra.mxu0 %v9012
  %v9201 = vpop.f32.mrf.mxu0
  %v9202 = vadd.f32 0.0, %v9201
  %v9203 = vpop.f32.mrf.mxu0
  %v9204 = vpop.f32.mrf.mxu0
  %v9205 = vadd.f32 0.0, %v9204
  %v9206 = vpop.f32.mrf.mxu0
  %9207 = vdwg.mxu0
  %9208 = vmatprep.subr.bf16.mxu0 0
  %9209 = vmatpush1.bf16.msra.mxu0 %v9134
  %9210 = vmatprep.subr.bf16.mxu0 0
  %9211 = vmatpush1.bf16.msra.mxu0 %v9133
  %9212 = vmatprep.subr.bf16.mxu0 0
  %9213 = vmatpush1.bf16.msra.mxu0 %v9132
  %9214 = vmatprep.subr.bf16.mxu0 0
  %9215 = vmatpush1.bf16.msra.mxu0 %v9131
  %9216 = vmatprep.subr.bf16.mxu0 0
  %9217 = vmatpush1.bf16.msra.mxu0 %v9130
  %9218 = vmatprep.subr.bf16.mxu0 0
  %9219 = vmatpush1.bf16.msra.mxu0 %v9129
  %9220 = vmatprep.subr.bf16.mxu0 0
  %9221 = vmatpush1.bf16.msra.mxu0 %v9128
  %9222 = vmatprep.subr.bf16.mxu0 0
  %9223 = vmatpush1.bf16.msra.mxu0 %v9127
  %9224 = vmatprep.subr.bf16.mxu0 0
  %9225 = vmatpush2.bf16.msra.mxu0 0
  %9226 = vmatprep.subr.bf16.mxu0 0
  %9227 = vmatpush2.bf16.msra.mxu0 0
  %9228 = vmatprep.subr.bf16.mxu0 0
  %9229 = vmatpush2.bf16.msra.mxu0 0
  %9230 = vmatprep.subr.bf16.mxu0 0
  %9231 = vmatpush2.bf16.msra.mxu0 0
  %9232 = vmatprep.subr.bf16.mxu0 0
  %9233 = vmatpush2.bf16.msra.mxu0 0
  %9234 = vmatprep.subr.bf16.mxu0 0
  %9235 = vmatpush2.bf16.msra.mxu0 0
  %9236 = vmatprep.subr.bf16.mxu0 0
  %9237 = vmatpush2.bf16.msra.mxu0 0
  %9238 = vmatprep.subr.bf16.mxu0 0
  %9239 = vmatpush2.bf16.msra.mxu0 0
  %9240 = vmatprep.mubr.bf16.mxu0 0
  %9241 = vmatmul.mubr.bf16.gmra.mxu0 %v9011
  %v9242 = vpop.f32.mrf.mxu0
  %v9243 = vadd.f32 %v9194, %v9242
  %v9244 = vpop.f32.mrf.mxu0
  %v9245 = vpop.f32.mrf.mxu0
  %v9246 = vadd.f32 %v9197, %v9245
  %v9247 = vpop.f32.mrf.mxu0
  %9248 = vmatprep.mubr.bf16.mxu0 0
  %9249 = vmatmul.mubr.bf16.gmra.mxu0 %v9014
  %v9250 = vpop.f32.mrf.mxu0
  %v9251 = vadd.f32 %v9202, %v9250
  %v9252 = vpop.f32.mrf.mxu0
  %v9253 = vpop.f32.mrf.mxu0
  %v9254 = vadd.f32 %v9205, %v9253
  %v9255 = vpop.f32.mrf.mxu0
  %9256 = vdwg.mxu0
  %9257 = vmatprep.subr.bf16.mxu0 0
  %9258 = vmatpush1.bf16.msra.mxu0 %v9118
  %9259 = vmatprep.subr.bf16.mxu0 0
  %9260 = vmatpush1.bf16.msra.mxu0 %v9117
  %9261 = vmatprep.subr.bf16.mxu0 0
  %9262 = vmatpush1.bf16.msra.mxu0 %v9116
  %9263 = vmatprep.subr.bf16.mxu0 0
  %9264 = vmatpush1.bf16.msra.mxu0 %v9115
  %9265 = vmatprep.subr.bf16.mxu0 0
  %9266 = vmatpush1.bf16.msra.mxu0 %v9114
  %9267 = vmatprep.subr.bf16.mxu0 0
  %9268 = vmatpush1.bf16.msra.mxu0 %v9113
  %9269 = vmatprep.subr.bf16.mxu0 0
  %9270 = vmatpush1.bf16.msra.mxu0 %v9112
  %9271 = vmatprep.subr.bf16.mxu0 0
  %9272 = vmatpush1.bf16.msra.mxu0 %v9111
  %9273 = vmatprep.subr.bf16.mxu0 0
  %9274 = vmatpush2.bf16.msra.mxu0 %v9126
  %9275 = vmatprep.subr.bf16.mxu0 0
  %9276 = vmatpush2.bf16.msra.mxu0 %v9125
  %9277 = vmatprep.subr.bf16.mxu0 0
  %9278 = vmatpush2.bf16.msra.mxu0 %v9124
  %9279 = vmatprep.subr.bf16.mxu0 0
  %9280 = vmatpush2.bf16.msra.mxu0 %v9123
  %9281 = vmatprep.subr.bf16.mxu0 0
  %9282 = vmatpush2.bf16.msra.mxu0 %v9122
  %9283 = vmatprep.subr.bf16.mxu0 0
  %9284 = vmatpush2.bf16.msra.mxu0 %v9121
  %9285 = vmatprep.subr.bf16.mxu0 0
  %9286 = vmatpush2.bf16.msra.mxu0 %v9120
  %9287 = vmatprep.subr.bf16.mxu0 0
  %9288 = vmatpush2.bf16.msra.mxu0 %v9119
  %9289 = vmatprep.mubr.bf16.mxu0 %v8980
  %9290 = vmatmul.mubr.bf16.gmra.mxu0 %v8979
  %v9291 = vpop.f32.mrf.mxu0
  %v9292 = vadd.f32 %v9243, %v9291
  %v9293 = vpop.f32.mrf.mxu0
  %v9294 = vpop.f32.mrf.mxu0
  %v9295 = vadd.f32 %v9246, %v9294
  %v9296 = vpop.f32.mrf.mxu0
  %9297 = vmatprep.mubr.bf16.mxu0 %v8983
  %9298 = vmatmul.mubr.bf16.gmra.mxu0 %v8982
  %v9299 = vpop.f32.mrf.mxu0
  %v9300 = vadd.f32 %v9251, %v9299
  %v9301 = vpop.f32.mrf.mxu0
  %v9302 = vpop.f32.mrf.mxu0
  %v9303 = vadd.f32 %v9254, %v9302
  %v9304 = vpop.f32.mrf.mxu0
  %9305 = vdwg.mxu0
  %9306 = vmatprep.subr.bf16.mxu0 0
  %9307 = vmatpush1.bf16.msra.mxu0 %v9134
  %9308 = vmatprep.subr.bf16.mxu0 0
  %9309 = vmatpush1.bf16.msra.mxu0 %v9133
  %9310 = vmatprep.subr.bf16.mxu0 0
  %9311 = vmatpush1.bf16.msra.mxu0 %v9132
  %9312 = vmatprep.subr.bf16.mxu0 0
  %9313 = vmatpush1.bf16.msra.mxu0 %v9131
  %9314 = vmatprep.subr.bf16.mxu0 0
  %9315 = vmatpush1.bf16.msra.mxu0 %v9130
  %9316 = vmatprep.subr.bf16.mxu0 0
  %9317 = vmatpush1.bf16.msra.mxu0 %v9129
  %9318 = vmatprep.subr.bf16.mxu0 0
  %9319 = vmatpush1.bf16.msra.mxu0 %v9128
  %9320 = vmatprep.subr.bf16.mxu0 0
  %9321 = vmatpush1.bf16.msra.mxu0 %v9127
  %9322 = vmatprep.subr.bf16.mxu0 0
  %9323 = vmatpush2.bf16.msra.mxu0 0
  %9324 = vmatprep.subr.bf16.mxu0 0
  %9325 = vmatpush2.bf16.msra.mxu0 0
  %9326 = vmatprep.subr.bf16.mxu0 0
  %9327 = vmatpush2.bf16.msra.mxu0 0
  %9328 = vmatprep.subr.bf16.mxu0 0
  %9329 = vmatpush2.bf16.msra.mxu0 0
  %9330 = vmatprep.subr.bf16.mxu0 0
  %9331 = vmatpush2.bf16.msra.mxu0 0
  %9332 = vmatprep.subr.bf16.mxu0 0
  %9333 = vmatpush2.bf16.msra.mxu0 0
  %9334 = vmatprep.subr.bf16.mxu0 0
  %9335 = vmatpush2.bf16.msra.mxu0 0
  %9336 = vmatprep.subr.bf16.mxu0 0
  %9337 = vmatpush2.bf16.msra.mxu0 0
  %9338 = vmatprep.mubr.bf16.mxu0 0
  %9339 = vmatmul.mubr.bf16.gmra.mxu0 %v8981
  %v9340 = vpop.f32.mrf.mxu0
  %v9341 = vadd.f32 %v9292, %v9340
  %v9342 = vpop.f32.mrf.mxu0
  %v9343 = vpop.f32.mrf.mxu0
  %v9344 = vadd.f32 %v9295, %v9343
  %v9345 = vpop.f32.mrf.mxu0
  %9346 = vmatprep.mubr.bf16.mxu0 0
  %9347 = vmatmul.mubr.bf16.gmra.mxu0 %v8984
  %v9348 = vpop.f32.mrf.mxu0
  %v9349 = vadd.f32 %v9300, %v9348
  %v9350 = vpop.f32.mrf.mxu0
  %v9351 = vpop.f32.mrf.mxu0
  %v9352 = vadd.f32 %v9303, %v9351
  %v9353 = vpop.f32.mrf.mxu0
  %9354 = vdwg.mxu0
  %v9403 = vunpack.c.l.b16 %v8931
  %v9404 = vunpack.c.l.b16 %v8932
  %v9405 = vunpack.c.l.b16 %v8933
  %v9406 = vunpack.c.l.b16 %v8934
  %v9407 = vunpack.c.l.b16 %v8935
  %v9408 = vunpack.c.l.b16 %v8936
  %v9409 = vunpack.c.l.b16 %v8937
  %v9410 = vunpack.c.l.b16 %v8938
  %v9411 = vunpack.c.l.b16 %v8939
  %v9412 = vunpack.c.l.b16 %v8940
  %v9413 = vunpack.c.l.b16 %v8941
  %v9414 = vunpack.c.l.b16 %v8942
  %v9415 = vunpack.c.l.b16 %v8943
  %v9416 = vunpack.c.l.b16 %v8944
  %v9417 = vunpack.c.l.b16 %v8945
  %v9418 = vunpack.c.l.b16 %v8946
  %v9419 = vunpack.c.l.b16 %v8947
  %v9420 = vunpack.c.l.b16 %v8948
  %v9421 = vunpack.c.l.b16 %v8949
  %v9422 = vunpack.c.l.b16 %v8950
  %v9423 = vunpack.c.l.b16 %v8951
  %v9424 = vunpack.c.l.b16 %v8952
  %v9425 = vunpack.c.l.b16 %v8953
  %v9426 = vunpack.c.l.b16 %v8954
  %v9427 = vunpack.c.l.b16 %v8955
  %v9428 = vunpack.c.l.b16 %v8956
  %v9429 = vunpack.c.l.b16 %v8957
  %v9430 = vunpack.c.l.b16 %v8958
  %v9431 = vunpack.c.l.b16 %v8959
  %v9432 = vunpack.c.l.b16 %v8960
  %v9433 = vunpack.c.l.b16 %v8961
  %v9434 = vunpack.c.l.b16 %v8962
  %v9435 = vunpack.c.l.b16 %v8963
  %v9436 = vunpack.c.l.b16 %v8964
  %v9437 = vunpack.c.l.b16 %v8965
  %v9438 = vunpack.c.l.b16 %v8966
  %v9439 = vunpack.c.l.b16 %v8967
  %v9440 = vunpack.c.l.b16 %v8968
  %v9441 = vunpack.c.l.b16 %v8969
  %v9442 = vunpack.c.l.b16 %v8970
  %v9443 = vunpack.c.l.b16 %v8971
  %v9444 = vunpack.c.l.b16 %v8972
  %v9445 = vunpack.c.l.b16 %v8973
  %v9446 = vunpack.c.l.b16 %v8974
  %v9447 = vunpack.c.l.b16 %v8975
  %v9448 = vunpack.c.l.b16 %v8976
  %v9449 = vunpack.c.l.b16 %v8977
  %v9450 = vunpack.c.l.b16 %v8978
  %v9451 = vpack.c.b16 %v9404, %v9403
  %v9452 = vpack.c.b16 %v9406, %v9405
  %v9453 = vpack.c.b16 %v9408, %v9407
  %v9454 = vpack.c.b16 %v9410, %v9409
  %v9455 = vpack.c.b16 %v9412, %v9411
  %v9456 = vpack.c.b16 %v9414, %v9413
  %v9457 = vpack.c.b16 %v9416, %v9415
  %v9458 = vpack.c.b16 %v9418, %v9417
  %v9459 = vpack.c.b16 %v9420, %v9419
  %v9460 = vpack.c.b16 %v9422, %v9421
  %v9461 = vpack.c.b16 %v9424, %v9423
  %v9462 = vpack.c.b16 %v9426, %v9425
  %v9463 = vpack.c.b16 %v9428, %v9427
  %v9464 = vpack.c.b16 %v9430, %v9429
  %v9465 = vpack.c.b16 %v9432, %v9431
  %v9466 = vpack.c.b16 %v9434, %v9433
  %v9467 = vpack.c.b16 %v9436, %v9435
  %v9468 = vpack.c.b16 %v9438, %v9437
  %v9469 = vpack.c.b16 %v9440, %v9439
  %v9470 = vpack.c.b16 %v9442, %v9441
  %v9471 = vpack.c.b16 %v9444, %v9443
  %v9472 = vpack.c.b16 %v9446, %v9445
  %v9473 = vpack.c.b16 %v9448, %v9447
  %v9474 = vpack.c.b16 %v9450, %v9449
  %9499 = vmatprep.subr.bf16.mxu0 0
  %9500 = vmatpush1.bf16.msra.mxu0 %v9458
  %9501 = vmatprep.subr.bf16.mxu0 0
  %9502 = vmatpush1.bf16.msra.mxu0 %v9457
  %9503 = vmatprep.subr.bf16.mxu0 0
  %9504 = vmatpush1.bf16.msra.mxu0 %v9456
  %9505 = vmatprep.subr.bf16.mxu0 0
  %9506 = vmatpush1.bf16.msra.mxu0 %v9455
  %9507 = vmatprep.subr.bf16.mxu0 0
  %9508 = vmatpush1.bf16.msra.mxu0 %v9454
  %9509 = vmatprep.subr.bf16.mxu0 0
  %9510 = vmatpush1.bf16.msra.mxu0 %v9453
  %9511 = vmatprep.subr.bf16.mxu0 0
  %9512 = vmatpush1.bf16.msra.mxu0 %v9452
  %9513 = vmatprep.subr.bf16.mxu0 0
  %9514 = vmatpush1.bf16.msra.mxu0 %v9451
  %9515 = vmatprep.subr.bf16.mxu0 0
  %9516 = vmatpush2.bf16.msra.mxu0 %v9466
  %9517 = vmatprep.subr.bf16.mxu0 0
  %9518 = vmatpush2.bf16.msra.mxu0 %v9465
  %9519 = vmatprep.subr.bf16.mxu0 0
  %9520 = vmatpush2.bf16.msra.mxu0 %v9464
  %9521 = vmatprep.subr.bf16.mxu0 0
  %9522 = vmatpush2.bf16.msra.mxu0 %v9463
  %9523 = vmatprep.subr.bf16.mxu0 0
  %9524 = vmatpush2.bf16.msra.mxu0 %v9462
  %9525 = vmatprep.subr.bf16.mxu0 0
  %9526 = vmatpush2.bf16.msra.mxu0 %v9461
  %9527 = vmatprep.subr.bf16.mxu0 0
  %9528 = vmatpush2.bf16.msra.mxu0 %v9460
  %9529 = vmatprep.subr.bf16.mxu0 0
  %9530 = vmatpush2.bf16.msra.mxu0 %v9459
  %9531 = vmatprep.mubr.bf16.mxu0 %v8980
  %9532 = vmatmul.mubr.bf16.gmra.mxu0 %v8979
  %v9533 = vpop.f32.mrf.mxu0
  %v9534 = vadd.f32 0.0, %v9533
  %v9535 = vpop.f32.mrf.mxu0
  %v9536 = vpop.f32.mrf.mxu0
  %v9537 = vadd.f32 0.0, %v9536
  %v9538 = vpop.f32.mrf.mxu0
  %9539 = vmatprep.mubr.bf16.mxu0 %v8983
  %9540 = vmatmul.mubr.bf16.gmra.mxu0 %v8982
  %v9541 = vpop.f32.mrf.mxu0
  %v9542 = vadd.f32 0.0, %v9541
  %v9543 = vpop.f32.mrf.mxu0
  %v9544 = vpop.f32.mrf.mxu0
  %v9545 = vadd.f32 0.0, %v9544
  %v9546 = vpop.f32.mrf.mxu0
  %9547 = vdwg.mxu0
  %9548 = vmatprep.subr.bf16.mxu0 0
  %9549 = vmatpush1.bf16.msra.mxu0 %v9474
  %9550 = vmatprep.subr.bf16.mxu0 0
  %9551 = vmatpush1.bf16.msra.mxu0 %v9473
  %9552 = vmatprep.subr.bf16.mxu0 0
  %9553 = vmatpush1.bf16.msra.mxu0 %v9472
  %9554 = vmatprep.subr.bf16.mxu0 0
  %9555 = vmatpush1.bf16.msra.mxu0 %v9471
  %9556 = vmatprep.subr.bf16.mxu0 0
  %9557 = vmatpush1.bf16.msra.mxu0 %v9470
  %9558 = vmatprep.subr.bf16.mxu0 0
  %9559 = vmatpush1.bf16.msra.mxu0 %v9469
  %9560 = vmatprep.subr.bf16.mxu0 0
  %9561 = vmatpush1.bf16.msra.mxu0 %v9468
  %9562 = vmatprep.subr.bf16.mxu0 0
  %9563 = vmatpush1.bf16.msra.mxu0 %v9467
  %9564 = vmatprep.subr.bf16.mxu0 0
  %9565 = vmatpush2.bf16.msra.mxu0 0
  %9566 = vmatprep.subr.bf16.mxu0 0
  %9567 = vmatpush2.bf16.msra.mxu0 0
  %9568 = vmatprep.subr.bf16.mxu0 0
  %9569 = vmatpush2.bf16.msra.mxu0 0
  %9570 = vmatprep.subr.bf16.mxu0 0
  %9571 = vmatpush2.bf16.msra.mxu0 0
  %9572 = vmatprep.subr.bf16.mxu0 0
  %9573 = vmatpush2.bf16.msra.mxu0 0
  %9574 = vmatprep.subr.bf16.mxu0 0
  %9575 = vmatpush2.bf16.msra.mxu0 0
  %9576 = vmatprep.subr.bf16.mxu0 0
  %9577 = vmatpush2.bf16.msra.mxu0 0
  %9578 = vmatprep.subr.bf16.mxu0 0
  %9579 = vmatpush2.bf16.msra.mxu0 0
  %9580 = vmatprep.mubr.bf16.mxu0 0
  %9581 = vmatmul.mubr.bf16.gmra.mxu0 %v8981
  %v9582 = vpop.f32.mrf.mxu0
  %v9583 = vadd.f32 %v9534, %v9582
  %v9584 = vpop.f32.mrf.mxu0
  %v9585 = vpop.f32.mrf.mxu0
  %v9586 = vadd.f32 %v9537, %v9585
  %v9587 = vpop.f32.mrf.mxu0
  %9588 = vmatprep.mubr.bf16.mxu0 0
  %9589 = vmatmul.mubr.bf16.gmra.mxu0 %v8984
  %v9590 = vpop.f32.mrf.mxu0
  %v9591 = vadd.f32 %v9542, %v9590
  %v9592 = vpop.f32.mrf.mxu0
  %v9593 = vpop.f32.mrf.mxu0
  %v9594 = vadd.f32 %v9545, %v9593
  %v9595 = vpop.f32.mrf.mxu0
  %9596 = vdwg.mxu0
  %v9597 = vadd.f32 %v9341, %v9583
  %v9598 = vadd.f32 %v9344, %v9586
  %v9599 = vadd.f32 %v9349, %v9591
  %v9600 = vadd.f32 %v9352, %v9594
  %v9601 = vadd.f32 %v8865, %v9597
  %v9602 = vadd.f32 %v8866, %v9598
  %v9603 = vadd.f32 %v8867, %v9599
  %v9604 = vadd.f32 %v8868, %v9600
  %v9605 = vld [vmem:[#allocation2 + $0x90] sm:$0xff]
  %v9606 = vld [vmem:[#allocation2 + $0x98] sm:$0xff]
  %v9607 = vld [vmem:[#allocation2 + $0xa0] sm:$0xff]
  %v9608 = vld [vmem:[#allocation2 + $0xa8] sm:$0xff]
  %v9609 = vld [vmem:[#allocation2 + $0xb0] sm:$0xff]
  %v9610 = vld [vmem:[#allocation2 + $0xb8] sm:$0xff]
  %v9611 = vld [vmem:[#allocation2 + $0xc0] sm:$0xff]
  %v9612 = vld [vmem:[#allocation2 + $0xc8] sm:$0xff]
  %v9613 = vld [vmem:[#allocation2 + $0xd0] sm:$0xff]
  %v9614 = vld [vmem:[#allocation2 + $0xd8] sm:$0xff]
  %v9615 = vld [vmem:[#allocation2 + $0xe0] sm:$0xff]
  %v9616 = vld [vmem:[#allocation2 + $0xe8] sm:$0xff]
  %s9617 = scalar_lea.vmem %s5, 1152
  %v9618 = vld [vmem:[%s9617] sm:$0xf]
  %v9619 = vld [vmem:[%s9617 + $0x4] sm:$0xf]
  %v9620 = vld [vmem:[%s9617 + $0x8] sm:$0xf]
  %v9621 = vld [vmem:[%s9617 + $0xc] sm:$0xf]
  %v9622 = vld [vmem:[%s9617 + $0x10] sm:$0xf]
  %v9623 = vld [vmem:[%s9617 + $0x14] sm:$0xf]
  %v9624 = vld [vmem:[%s9617 + $0x18] sm:$0xf]
  %v9625 = vld [vmem:[%s9617 + $0x1c] sm:$0xf]
  %v9626 = vld [vmem:[%s9617 + $0x20] sm:$0xf]
  %v9627 = vld [vmem:[%s9617 + $0x24] sm:$0xf]
  %v9628 = vld [vmem:[%s9617 + $0x28] sm:$0xf]
  %v9629 = vld [vmem:[%s9617 + $0x2c] sm:$0xf]
  %v9630 = vld [vmem:[%s9617 + $0x30] sm:$0xf]
  %v9631 = vld [vmem:[%s9617 + $0x34] sm:$0xf]
  %v9632 = vld [vmem:[%s9617 + $0x38] sm:$0xf]
  %v9633 = vld [vmem:[%s9617 + $0x3c] sm:$0xf]
  %v9634 = vld [vmem:[%s9617 + $0x40] sm:$0xf]
  %v9635 = vld [vmem:[%s9617 + $0x44] sm:$0xf]
  %v9636 = vld [vmem:[%s9617 + $0x48] sm:$0xf]
  %v9637 = vld [vmem:[%s9617 + $0x4c] sm:$0xf]
  %v9638 = vld [vmem:[%s9617 + $0x50] sm:$0xf]
  %v9639 = vld [vmem:[%s9617 + $0x54] sm:$0xf]
  %v9640 = vld [vmem:[%s9617 + $0x58] sm:$0xf]
  %v9641 = vld [vmem:[%s9617 + $0x5c] sm:$0xf]
  %v9642 = vld [vmem:[%s9617 + $0x60] sm:$0xf]
  %v9643 = vld [vmem:[%s9617 + $0x64] sm:$0xf]
  %v9644 = vld [vmem:[%s9617 + $0x68] sm:$0xf]
  %v9645 = vld [vmem:[%s9617 + $0x6c] sm:$0xf]
  %v9646 = vld [vmem:[%s9617 + $0x70] sm:$0xf]
  %v9647 = vld [vmem:[%s9617 + $0x74] sm:$0xf]
  %v9648 = vld [vmem:[%s9617 + $0x78] sm:$0xf]
  %v9649 = vld [vmem:[%s9617 + $0x7c] sm:$0xf]
  %v9650 = vld [vmem:[%s9617 + $0x80] sm:$0xf]
  %v9651 = vld [vmem:[%s9617 + $0x84] sm:$0xf]
  %v9652 = vld [vmem:[%s9617 + $0x88] sm:$0xf]
  %v9653 = vld [vmem:[%s9617 + $0x8c] sm:$0xf]
  %v9654 = vld [vmem:[%s9617 + $0x90] sm:$0xf]
  %v9655 = vld [vmem:[%s9617 + $0x94] sm:$0xf]
  %v9656 = vld [vmem:[%s9617 + $0x98] sm:$0xf]
  %v9657 = vld [vmem:[%s9617 + $0x9c] sm:$0xf]
  %v9658 = vld [vmem:[%s9617 + $0xa0] sm:$0xf]
  %v9659 = vld [vmem:[%s9617 + $0xa4] sm:$0xf]
  %v9660 = vld [vmem:[%s9617 + $0xa8] sm:$0xf]
  %v9661 = vld [vmem:[%s9617 + $0xac] sm:$0xf]
  %v9662 = vld [vmem:[%s9617 + $0xb0] sm:$0xf]
  %v9663 = vld [vmem:[%s9617 + $0xb4] sm:$0xf]
  %v9664 = vld [vmem:[%s9617 + $0xb8] sm:$0xf]
  %v9665 = vld [vmem:[%s9617 + $0xbc] sm:$0xf]
  %s9666 = scalar_lea.vmem %s6, 1152
  %v9667 = vld [vmem:[%s9666] sm:$0xf]
  %v9668 = vld [vmem:[%s9666 + $0x4] sm:$0xf]
  %v9669 = vld [vmem:[%s9666 + $0x8] sm:$0xf]
  %v9670 = vld [vmem:[%s9666 + $0xc] sm:$0xf]
  %v9671 = vld [vmem:[%s9666 + $0x10] sm:$0xf]
  %v9672 = vld [vmem:[%s9666 + $0x14] sm:$0xf]
  %v9673 = vld [vmem:[%s9666 + $0x18] sm:$0xf]
  %v9674 = vld [vmem:[%s9666 + $0x1c] sm:$0xf]
  %v9675 = vld [vmem:[%s9666 + $0x20] sm:$0xf]
  %v9676 = vld [vmem:[%s9666 + $0x24] sm:$0xf]
  %v9677 = vld [vmem:[%s9666 + $0x28] sm:$0xf]
  %v9678 = vld [vmem:[%s9666 + $0x2c] sm:$0xf]
  %v9679 = vld [vmem:[%s9666 + $0x30] sm:$0xf]
  %v9680 = vld [vmem:[%s9666 + $0x34] sm:$0xf]
  %v9681 = vld [vmem:[%s9666 + $0x38] sm:$0xf]
  %v9682 = vld [vmem:[%s9666 + $0x3c] sm:$0xf]
  %v9683 = vld [vmem:[%s9666 + $0x40] sm:$0xf]
  %v9684 = vld [vmem:[%s9666 + $0x44] sm:$0xf]
  %v9685 = vld [vmem:[%s9666 + $0x48] sm:$0xf]
  %v9686 = vld [vmem:[%s9666 + $0x4c] sm:$0xf]
  %v9687 = vld [vmem:[%s9666 + $0x50] sm:$0xf]
  %v9688 = vld [vmem:[%s9666 + $0x54] sm:$0xf]
  %v9689 = vld [vmem:[%s9666 + $0x58] sm:$0xf]
  %v9690 = vld [vmem:[%s9666 + $0x5c] sm:$0xf]
  %v9691 = vld [vmem:[%s9666 + $0x60] sm:$0xf]
  %v9692 = vld [vmem:[%s9666 + $0x64] sm:$0xf]
  %v9693 = vld [vmem:[%s9666 + $0x68] sm:$0xf]
  %v9694 = vld [vmem:[%s9666 + $0x6c] sm:$0xf]
  %v9695 = vld [vmem:[%s9666 + $0x70] sm:$0xf]
  %v9696 = vld [vmem:[%s9666 + $0x74] sm:$0xf]
  %v9697 = vld [vmem:[%s9666 + $0x78] sm:$0xf]
  %v9698 = vld [vmem:[%s9666 + $0x7c] sm:$0xf]
  %v9699 = vld [vmem:[%s9666 + $0x80] sm:$0xf]
  %v9700 = vld [vmem:[%s9666 + $0x84] sm:$0xf]
  %v9701 = vld [vmem:[%s9666 + $0x88] sm:$0xf]
  %v9702 = vld [vmem:[%s9666 + $0x8c] sm:$0xf]
  %v9703 = vld [vmem:[%s9666 + $0x90] sm:$0xf]
  %v9704 = vld [vmem:[%s9666 + $0x94] sm:$0xf]
  %v9705 = vld [vmem:[%s9666 + $0x98] sm:$0xf]
  %v9706 = vld [vmem:[%s9666 + $0x9c] sm:$0xf]
  %v9707 = vld [vmem:[%s9666 + $0xa0] sm:$0xf]
  %v9708 = vld [vmem:[%s9666 + $0xa4] sm:$0xf]
  %v9709 = vld [vmem:[%s9666 + $0xa8] sm:$0xf]
  %v9710 = vld [vmem:[%s9666 + $0xac] sm:$0xf]
  %v9711 = vld [vmem:[%s9666 + $0xb0] sm:$0xf]
  %v9712 = vld [vmem:[%s9666 + $0xb4] sm:$0xf]
  %v9713 = vld [vmem:[%s9666 + $0xb8] sm:$0xf]
  %v9714 = vld [vmem:[%s9666 + $0xbc] sm:$0xf]
  %v9715 = vpack.c.bf16 %v9608, %v9605
  %v9716 = vpack.c.bf16 %v9609, %v9606
  %v9717 = vpack.c.bf16 %v9610, %v9607
  %v9718 = vpack.c.bf16 %v9614, %v9611
  %v9719 = vpack.c.bf16 %v9615, %v9612
  %v9720 = vpack.c.bf16 %v9616, %v9613
  %v9721 = vunpack.c.l.bf16 %v9715
  %v9722 = vunpack.c.l.bf16 %v9716
  %v9723 = vunpack.c.l.bf16 %v9717
  %v9724 = vunpack.c.h.bf16 %v9715
  %v9725 = vunpack.c.h.bf16 %v9716
  %v9726 = vunpack.c.h.bf16 %v9717
  %v9727 = vunpack.c.l.bf16 %v9718
  %v9728 = vunpack.c.l.bf16 %v9719
  %v9729 = vunpack.c.l.bf16 %v9720
  %v9730 = vunpack.c.h.bf16 %v9718
  %v9731 = vunpack.c.h.bf16 %v9719
  %v9732 = vunpack.c.h.bf16 %v9720
  %v9733 = vsub.f32 %v9605, %v9721
  %v9734 = vsub.f32 %v9606, %v9722
  %v9735 = vsub.f32 %v9607, %v9723
  %v9736 = vsub.f32 %v9608, %v9724
  %v9737 = vsub.f32 %v9609, %v9725
  %v9738 = vsub.f32 %v9610, %v9726
  %v9739 = vsub.f32 %v9611, %v9727
  %v9740 = vsub.f32 %v9612, %v9728
  %v9741 = vsub.f32 %v9613, %v9729
  %v9742 = vsub.f32 %v9614, %v9730
  %v9743 = vsub.f32 %v9615, %v9731
  %v9744 = vsub.f32 %v9616, %v9732
  %v9745 = vpack.c.bf16 %v9736, %v9733
  %v9746 = vpack.c.bf16 %v9737, %v9734
  %v9747 = vpack.c.bf16 %v9738, %v9735
  %v9748 = vpack.c.bf16 %v9742, %v9739
  %v9749 = vpack.c.bf16 %v9743, %v9740
  %v9750 = vpack.c.bf16 %v9744, %v9741
  %v9799 = vunpack.c.l.b16 %v9618
  %v9800 = vunpack.c.l.b16 %v9619
  %v9801 = vunpack.c.l.b16 %v9620
  %v9802 = vunpack.c.l.b16 %v9621
  %v9803 = vunpack.c.l.b16 %v9622
  %v9804 = vunpack.c.l.b16 %v9623
  %v9805 = vunpack.c.l.b16 %v9624
  %v9806 = vunpack.c.l.b16 %v9625
  %v9807 = vunpack.c.l.b16 %v9626
  %v9808 = vunpack.c.l.b16 %v9627
  %v9809 = vunpack.c.l.b16 %v9628
  %v9810 = vunpack.c.l.b16 %v9629
  %v9811 = vunpack.c.l.b16 %v9630
  %v9812 = vunpack.c.l.b16 %v9631
  %v9813 = vunpack.c.l.b16 %v9632
  %v9814 = vunpack.c.l.b16 %v9633
  %v9815 = vunpack.c.l.b16 %v9634
  %v9816 = vunpack.c.l.b16 %v9635
  %v9817 = vunpack.c.l.b16 %v9636
  %v9818 = vunpack.c.l.b16 %v9637
  %v9819 = vunpack.c.l.b16 %v9638
  %v9820 = vunpack.c.l.b16 %v9639
  %v9821 = vunpack.c.l.b16 %v9640
  %v9822 = vunpack.c.l.b16 %v9641
  %v9823 = vunpack.c.l.b16 %v9642
  %v9824 = vunpack.c.l.b16 %v9643
  %v9825 = vunpack.c.l.b16 %v9644
  %v9826 = vunpack.c.l.b16 %v9645
  %v9827 = vunpack.c.l.b16 %v9646
  %v9828 = vunpack.c.l.b16 %v9647
  %v9829 = vunpack.c.l.b16 %v9648
  %v9830 = vunpack.c.l.b16 %v9649
  %v9831 = vunpack.c.l.b16 %v9650
  %v9832 = vunpack.c.l.b16 %v9651
  %v9833 = vunpack.c.l.b16 %v9652
  %v9834 = vunpack.c.l.b16 %v9653
  %v9835 = vunpack.c.l.b16 %v9654
  %v9836 = vunpack.c.l.b16 %v9655
  %v9837 = vunpack.c.l.b16 %v9656
  %v9838 = vunpack.c.l.b16 %v9657
  %v9839 = vunpack.c.l.b16 %v9658
  %v9840 = vunpack.c.l.b16 %v9659
  %v9841 = vunpack.c.l.b16 %v9660
  %v9842 = vunpack.c.l.b16 %v9661
  %v9843 = vunpack.c.l.b16 %v9662
  %v9844 = vunpack.c.l.b16 %v9663
  %v9845 = vunpack.c.l.b16 %v9664
  %v9846 = vunpack.c.l.b16 %v9665
  %v9847 = vpack.c.b16 %v9800, %v9799
  %v9848 = vpack.c.b16 %v9802, %v9801
  %v9849 = vpack.c.b16 %v9804, %v9803
  %v9850 = vpack.c.b16 %v9806, %v9805
  %v9851 = vpack.c.b16 %v9808, %v9807
  %v9852 = vpack.c.b16 %v9810, %v9809
  %v9853 = vpack.c.b16 %v9812, %v9811
  %v9854 = vpack.c.b16 %v9814, %v9813
  %v9855 = vpack.c.b16 %v9816, %v9815
  %v9856 = vpack.c.b16 %v9818, %v9817
  %v9857 = vpack.c.b16 %v9820, %v9819
  %v9858 = vpack.c.b16 %v9822, %v9821
  %v9859 = vpack.c.b16 %v9824, %v9823
  %v9860 = vpack.c.b16 %v9826, %v9825
  %v9861 = vpack.c.b16 %v9828, %v9827
  %v9862 = vpack.c.b16 %v9830, %v9829
  %v9863 = vpack.c.b16 %v9832, %v9831
  %v9864 = vpack.c.b16 %v9834, %v9833
  %v9865 = vpack.c.b16 %v9836, %v9835
  %v9866 = vpack.c.b16 %v9838, %v9837
  %v9867 = vpack.c.b16 %v9840, %v9839
  %v9868 = vpack.c.b16 %v9842, %v9841
  %v9869 = vpack.c.b16 %v9844, %v9843
  %v9870 = vpack.c.b16 %v9846, %v9845
  %9895 = vmatprep.subr.bf16.mxu0 0
  %9896 = vmatpush1.bf16.msra.mxu0 %v9854
  %9897 = vmatprep.subr.bf16.mxu0 0
  %9898 = vmatpush1.bf16.msra.mxu0 %v9853
  %9899 = vmatprep.subr.bf16.mxu0 0
  %9900 = vmatpush1.bf16.msra.mxu0 %v9852
  %9901 = vmatprep.subr.bf16.mxu0 0
  %9902 = vmatpush1.bf16.msra.mxu0 %v9851
  %9903 = vmatprep.subr.bf16.mxu0 0
  %9904 = vmatpush1.bf16.msra.mxu0 %v9850
  %9905 = vmatprep.subr.bf16.mxu0 0
  %9906 = vmatpush1.bf16.msra.mxu0 %v9849
  %9907 = vmatprep.subr.bf16.mxu0 0
  %9908 = vmatpush1.bf16.msra.mxu0 %v9848
  %9909 = vmatprep.subr.bf16.mxu0 0
  %9910 = vmatpush1.bf16.msra.mxu0 %v9847
  %9911 = vmatprep.subr.bf16.mxu0 0
  %9912 = vmatpush2.bf16.msra.mxu0 %v9862
  %9913 = vmatprep.subr.bf16.mxu0 0
  %9914 = vmatpush2.bf16.msra.mxu0 %v9861
  %9915 = vmatprep.subr.bf16.mxu0 0
  %9916 = vmatpush2.bf16.msra.mxu0 %v9860
  %9917 = vmatprep.subr.bf16.mxu0 0
  %9918 = vmatpush2.bf16.msra.mxu0 %v9859
  %9919 = vmatprep.subr.bf16.mxu0 0
  %9920 = vmatpush2.bf16.msra.mxu0 %v9858
  %9921 = vmatprep.subr.bf16.mxu0 0
  %9922 = vmatpush2.bf16.msra.mxu0 %v9857
  %9923 = vmatprep.subr.bf16.mxu0 0
  %9924 = vmatpush2.bf16.msra.mxu0 %v9856
  %9925 = vmatprep.subr.bf16.mxu0 0
  %9926 = vmatpush2.bf16.msra.mxu0 %v9855
  %9927 = vmatprep.mubr.bf16.mxu0 %v9746
  %9928 = vmatmul.mubr.bf16.gmra.mxu0 %v9745
  %v9929 = vpop.f32.mrf.mxu0
  %v9930 = vadd.f32 0.0, %v9929
  %v9931 = vpop.f32.mrf.mxu0
  %v9932 = vpop.f32.mrf.mxu0
  %v9933 = vadd.f32 0.0, %v9932
  %v9934 = vpop.f32.mrf.mxu0
  %9935 = vmatprep.mubr.bf16.mxu0 %v9749
  %9936 = vmatmul.mubr.bf16.gmra.mxu0 %v9748
  %v9937 = vpop.f32.mrf.mxu0
  %v9938 = vadd.f32 0.0, %v9937
  %v9939 = vpop.f32.mrf.mxu0
  %v9940 = vpop.f32.mrf.mxu0
  %v9941 = vadd.f32 0.0, %v9940
  %v9942 = vpop.f32.mrf.mxu0
  %9943 = vdwg.mxu0
  %9944 = vmatprep.subr.bf16.mxu0 0
  %9945 = vmatpush1.bf16.msra.mxu0 %v9870
  %9946 = vmatprep.subr.bf16.mxu0 0
  %9947 = vmatpush1.bf16.msra.mxu0 %v9869
  %9948 = vmatprep.subr.bf16.mxu0 0
  %9949 = vmatpush1.bf16.msra.mxu0 %v9868
  %9950 = vmatprep.subr.bf16.mxu0 0
  %9951 = vmatpush1.bf16.msra.mxu0 %v9867
  %9952 = vmatprep.subr.bf16.mxu0 0
  %9953 = vmatpush1.bf16.msra.mxu0 %v9866
  %9954 = vmatprep.subr.bf16.mxu0 0
  %9955 = vmatpush1.bf16.msra.mxu0 %v9865
  %9956 = vmatprep.subr.bf16.mxu0 0
  %9957 = vmatpush1.bf16.msra.mxu0 %v9864
  %9958 = vmatprep.subr.bf16.mxu0 0
  %9959 = vmatpush1.bf16.msra.mxu0 %v9863
  %9960 = vmatprep.subr.bf16.mxu0 0
  %9961 = vmatpush2.bf16.msra.mxu0 0
  %9962 = vmatprep.subr.bf16.mxu0 0
  %9963 = vmatpush2.bf16.msra.mxu0 0
  %9964 = vmatprep.subr.bf16.mxu0 0
  %9965 = vmatpush2.bf16.msra.mxu0 0
  %9966 = vmatprep.subr.bf16.mxu0 0
  %9967 = vmatpush2.bf16.msra.mxu0 0
  %9968 = vmatprep.subr.bf16.mxu0 0
  %9969 = vmatpush2.bf16.msra.mxu0 0
  %9970 = vmatprep.subr.bf16.mxu0 0
  %9971 = vmatpush2.bf16.msra.mxu0 0
  %9972 = vmatprep.subr.bf16.mxu0 0
  %9973 = vmatpush2.bf16.msra.mxu0 0
  %9974 = vmatprep.subr.bf16.mxu0 0
  %9975 = vmatpush2.bf16.msra.mxu0 0
  %9976 = vmatprep.mubr.bf16.mxu0 0
  %9977 = vmatmul.mubr.bf16.gmra.mxu0 %v9747
  %v9978 = vpop.f32.mrf.mxu0
  %v9979 = vadd.f32 %v9930, %v9978
  %v9980 = vpop.f32.mrf.mxu0
  %v9981 = vpop.f32.mrf.mxu0
  %v9982 = vadd.f32 %v9933, %v9981
  %v9983 = vpop.f32.mrf.mxu0
  %9984 = vmatprep.mubr.bf16.mxu0 0
  %9985 = vmatmul.mubr.bf16.gmra.mxu0 %v9750
  %v9986 = vpop.f32.mrf.mxu0
  %v9987 = vadd.f32 %v9938, %v9986
  %v9988 = vpop.f32.mrf.mxu0
  %v9989 = vpop.f32.mrf.mxu0
  %v9990 = vadd.f32 %v9941, %v9989
  %v9991 = vpop.f32.mrf.mxu0
  %9992 = vdwg.mxu0
  %9993 = vmatprep.subr.bf16.mxu0 0
  %9994 = vmatpush1.bf16.msra.mxu0 %v9854
  %9995 = vmatprep.subr.bf16.mxu0 0
  %9996 = vmatpush1.bf16.msra.mxu0 %v9853
  %9997 = vmatprep.subr.bf16.mxu0 0
  %9998 = vmatpush1.bf16.msra.mxu0 %v9852
  %9999 = vmatprep.subr.bf16.mxu0 0
  %10000 = vmatpush1.bf16.msra.mxu0 %v9851
  %10001 = vmatprep.subr.bf16.mxu0 0
  %10002 = vmatpush1.bf16.msra.mxu0 %v9850
  %10003 = vmatprep.subr.bf16.mxu0 0
  %10004 = vmatpush1.bf16.msra.mxu0 %v9849
  %10005 = vmatprep.subr.bf16.mxu0 0
  %10006 = vmatpush1.bf16.msra.mxu0 %v9848
  %10007 = vmatprep.subr.bf16.mxu0 0
  %10008 = vmatpush1.bf16.msra.mxu0 %v9847
  %10009 = vmatprep.subr.bf16.mxu0 0
  %10010 = vmatpush2.bf16.msra.mxu0 %v9862
  %10011 = vmatprep.subr.bf16.mxu0 0
  %10012 = vmatpush2.bf16.msra.mxu0 %v9861
  %10013 = vmatprep.subr.bf16.mxu0 0
  %10014 = vmatpush2.bf16.msra.mxu0 %v9860
  %10015 = vmatprep.subr.bf16.mxu0 0
  %10016 = vmatpush2.bf16.msra.mxu0 %v9859
  %10017 = vmatprep.subr.bf16.mxu0 0
  %10018 = vmatpush2.bf16.msra.mxu0 %v9858
  %10019 = vmatprep.subr.bf16.mxu0 0
  %10020 = vmatpush2.bf16.msra.mxu0 %v9857
  %10021 = vmatprep.subr.bf16.mxu0 0
  %10022 = vmatpush2.bf16.msra.mxu0 %v9856
  %10023 = vmatprep.subr.bf16.mxu0 0
  %10024 = vmatpush2.bf16.msra.mxu0 %v9855
  %10025 = vmatprep.mubr.bf16.mxu0 %v9716
  %10026 = vmatmul.mubr.bf16.gmra.mxu0 %v9715
  %v10027 = vpop.f32.mrf.mxu0
  %v10028 = vadd.f32 %v9979, %v10027
  %v10029 = vpop.f32.mrf.mxu0
  %v10030 = vpop.f32.mrf.mxu0
  %v10031 = vadd.f32 %v9982, %v10030
  %v10032 = vpop.f32.mrf.mxu0
  %10033 = vmatprep.mubr.bf16.mxu0 %v9719
  %10034 = vmatmul.mubr.bf16.gmra.mxu0 %v9718
  %v10035 = vpop.f32.mrf.mxu0
  %v10036 = vadd.f32 %v9987, %v10035
  %v10037 = vpop.f32.mrf.mxu0
  %v10038 = vpop.f32.mrf.mxu0
  %v10039 = vadd.f32 %v9990, %v10038
  %v10040 = vpop.f32.mrf.mxu0
  %10041 = vdwg.mxu0
  %10042 = vmatprep.subr.bf16.mxu0 0
  %10043 = vmatpush1.bf16.msra.mxu0 %v9870
  %10044 = vmatprep.subr.bf16.mxu0 0
  %10045 = vmatpush1.bf16.msra.mxu0 %v9869
  %10046 = vmatprep.subr.bf16.mxu0 0
  %10047 = vmatpush1.bf16.msra.mxu0 %v9868
  %10048 = vmatprep.subr.bf16.mxu0 0
  %10049 = vmatpush1.bf16.msra.mxu0 %v9867
  %10050 = vmatprep.subr.bf16.mxu0 0
  %10051 = vmatpush1.bf16.msra.mxu0 %v9866
  %10052 = vmatprep.subr.bf16.mxu0 0
  %10053 = vmatpush1.bf16.msra.mxu0 %v9865
  %10054 = vmatprep.subr.bf16.mxu0 0
  %10055 = vmatpush1.bf16.msra.mxu0 %v9864
  %10056 = vmatprep.subr.bf16.mxu0 0
  %10057 = vmatpush1.bf16.msra.mxu0 %v9863
  %10058 = vmatprep.subr.bf16.mxu0 0
  %10059 = vmatpush2.bf16.msra.mxu0 0
  %10060 = vmatprep.subr.bf16.mxu0 0
  %10061 = vmatpush2.bf16.msra.mxu0 0
  %10062 = vmatprep.subr.bf16.mxu0 0
  %10063 = vmatpush2.bf16.msra.mxu0 0
  %10064 = vmatprep.subr.bf16.mxu0 0
  %10065 = vmatpush2.bf16.msra.mxu0 0
  %10066 = vmatprep.subr.bf16.mxu0 0
  %10067 = vmatpush2.bf16.msra.mxu0 0
  %10068 = vmatprep.subr.bf16.mxu0 0
  %10069 = vmatpush2.bf16.msra.mxu0 0
  %10070 = vmatprep.subr.bf16.mxu0 0
  %10071 = vmatpush2.bf16.msra.mxu0 0
  %10072 = vmatprep.subr.bf16.mxu0 0
  %10073 = vmatpush2.bf16.msra.mxu0 0
  %10074 = vmatprep.mubr.bf16.mxu0 0
  %10075 = vmatmul.mubr.bf16.gmra.mxu0 %v9717
  %v10076 = vpop.f32.mrf.mxu0
  %v10077 = vadd.f32 %v10028, %v10076
  %v10078 = vpop.f32.mrf.mxu0
  %v10079 = vpop.f32.mrf.mxu0
  %v10080 = vadd.f32 %v10031, %v10079
  %v10081 = vpop.f32.mrf.mxu0
  %10082 = vmatprep.mubr.bf16.mxu0 0
  %10083 = vmatmul.mubr.bf16.gmra.mxu0 %v9720
  %v10084 = vpop.f32.mrf.mxu0
  %v10085 = vadd.f32 %v10036, %v10084
  %v10086 = vpop.f32.mrf.mxu0
  %v10087 = vpop.f32.mrf.mxu0
  %v10088 = vadd.f32 %v10039, %v10087
  %v10089 = vpop.f32.mrf.mxu0
  %10090 = vdwg.mxu0
  %v10139 = vunpack.c.l.b16 %v9667
  %v10140 = vunpack.c.l.b16 %v9668
  %v10141 = vunpack.c.l.b16 %v9669
  %v10142 = vunpack.c.l.b16 %v9670
  %v10143 = vunpack.c.l.b16 %v9671
  %v10144 = vunpack.c.l.b16 %v9672
  %v10145 = vunpack.c.l.b16 %v9673
  %v10146 = vunpack.c.l.b16 %v9674
  %v10147 = vunpack.c.l.b16 %v9675
  %v10148 = vunpack.c.l.b16 %v9676
  %v10149 = vunpack.c.l.b16 %v9677
  %v10150 = vunpack.c.l.b16 %v9678
  %v10151 = vunpack.c.l.b16 %v9679
  %v10152 = vunpack.c.l.b16 %v9680
  %v10153 = vunpack.c.l.b16 %v9681
  %v10154 = vunpack.c.l.b16 %v9682
  %v10155 = vunpack.c.l.b16 %v9683
  %v10156 = vunpack.c.l.b16 %v9684
  %v10157 = vunpack.c.l.b16 %v9685
  %v10158 = vunpack.c.l.b16 %v9686
  %v10159 = vunpack.c.l.b16 %v9687
  %v10160 = vunpack.c.l.b16 %v9688
  %v10161 = vunpack.c.l.b16 %v9689
  %v10162 = vunpack.c.l.b16 %v9690
  %v10163 = vunpack.c.l.b16 %v9691
  %v10164 = vunpack.c.l.b16 %v9692
  %v10165 = vunpack.c.l.b16 %v9693
  %v10166 = vunpack.c.l.b16 %v9694
  %v10167 = vunpack.c.l.b16 %v9695
  %v10168 = vunpack.c.l.b16 %v9696
  %v10169 = vunpack.c.l.b16 %v9697
  %v10170 = vunpack.c.l.b16 %v9698
  %v10171 = vunpack.c.l.b16 %v9699
  %v10172 = vunpack.c.l.b16 %v9700
  %v10173 = vunpack.c.l.b16 %v9701
  %v10174 = vunpack.c.l.b16 %v9702
  %v10175 = vunpack.c.l.b16 %v9703
  %v10176 = vunpack.c.l.b16 %v9704
  %v10177 = vunpack.c.l.b16 %v9705
  %v10178 = vunpack.c.l.b16 %v9706
  %v10179 = vunpack.c.l.b16 %v9707
  %v10180 = vunpack.c.l.b16 %v9708
  %v10181 = vunpack.c.l.b16 %v9709
  %v10182 = vunpack.c.l.b16 %v9710
  %v10183 = vunpack.c.l.b16 %v9711
  %v10184 = vunpack.c.l.b16 %v9712
  %v10185 = vunpack.c.l.b16 %v9713
  %v10186 = vunpack.c.l.b16 %v9714
  %v10187 = vpack.c.b16 %v10140, %v10139
  %v10188 = vpack.c.b16 %v10142, %v10141
  %v10189 = vpack.c.b16 %v10144, %v10143
  %v10190 = vpack.c.b16 %v10146, %v10145
  %v10191 = vpack.c.b16 %v10148, %v10147
  %v10192 = vpack.c.b16 %v10150, %v10149
  %v10193 = vpack.c.b16 %v10152, %v10151
  %v10194 = vpack.c.b16 %v10154, %v10153
  %v10195 = vpack.c.b16 %v10156, %v10155
  %v10196 = vpack.c.b16 %v10158, %v10157
  %v10197 = vpack.c.b16 %v10160, %v10159
  %v10198 = vpack.c.b16 %v10162, %v10161
  %v10199 = vpack.c.b16 %v10164, %v10163
  %v10200 = vpack.c.b16 %v10166, %v10165
  %v10201 = vpack.c.b16 %v10168, %v10167
  %v10202 = vpack.c.b16 %v10170, %v10169
  %v10203 = vpack.c.b16 %v10172, %v10171
  %v10204 = vpack.c.b16 %v10174, %v10173
  %v10205 = vpack.c.b16 %v10176, %v10175
  %v10206 = vpack.c.b16 %v10178, %v10177
  %v10207 = vpack.c.b16 %v10180, %v10179
  %v10208 = vpack.c.b16 %v10182, %v10181
  %v10209 = vpack.c.b16 %v10184, %v10183
  %v10210 = vpack.c.b16 %v10186, %v10185
  %10235 = vmatprep.subr.bf16.mxu0 0
  %10236 = vmatpush1.bf16.msra.mxu0 %v10194
  %10237 = vmatprep.subr.bf16.mxu0 0
  %10238 = vmatpush1.bf16.msra.mxu0 %v10193
  %10239 = vmatprep.subr.bf16.mxu0 0
  %10240 = vmatpush1.bf16.msra.mxu0 %v10192
  %10241 = vmatprep.subr.bf16.mxu0 0
  %10242 = vmatpush1.bf16.msra.mxu0 %v10191
  %10243 = vmatprep.subr.bf16.mxu0 0
  %10244 = vmatpush1.bf16.msra.mxu0 %v10190
  %10245 = vmatprep.subr.bf16.mxu0 0
  %10246 = vmatpush1.bf16.msra.mxu0 %v10189
  %10247 = vmatprep.subr.bf16.mxu0 0
  %10248 = vmatpush1.bf16.msra.mxu0 %v10188
  %10249 = vmatprep.subr.bf16.mxu0 0
  %10250 = vmatpush1.bf16.msra.mxu0 %v10187
  %10251 = vmatprep.subr.bf16.mxu0 0
  %10252 = vmatpush2.bf16.msra.mxu0 %v10202
  %10253 = vmatprep.subr.bf16.mxu0 0
  %10254 = vmatpush2.bf16.msra.mxu0 %v10201
  %10255 = vmatprep.subr.bf16.mxu0 0
  %10256 = vmatpush2.bf16.msra.mxu0 %v10200
  %10257 = vmatprep.subr.bf16.mxu0 0
  %10258 = vmatpush2.bf16.msra.mxu0 %v10199
  %10259 = vmatprep.subr.bf16.mxu0 0
  %10260 = vmatpush2.bf16.msra.mxu0 %v10198
  %10261 = vmatprep.subr.bf16.mxu0 0
  %10262 = vmatpush2.bf16.msra.mxu0 %v10197
  %10263 = vmatprep.subr.bf16.mxu0 0
  %10264 = vmatpush2.bf16.msra.mxu0 %v10196
  %10265 = vmatprep.subr.bf16.mxu0 0
  %10266 = vmatpush2.bf16.msra.mxu0 %v10195
  %10267 = vmatprep.mubr.bf16.mxu0 %v9716
  %10268 = vmatmul.mubr.bf16.gmra.mxu0 %v9715
  %v10269 = vpop.f32.mrf.mxu0
  %v10270 = vadd.f32 0.0, %v10269
  %v10271 = vpop.f32.mrf.mxu0
  %v10272 = vpop.f32.mrf.mxu0
  %v10273 = vadd.f32 0.0, %v10272
  %v10274 = vpop.f32.mrf.mxu0
  %10275 = vmatprep.mubr.bf16.mxu0 %v9719
  %10276 = vmatmul.mubr.bf16.gmra.mxu0 %v9718
  %v10277 = vpop.f32.mrf.mxu0
  %v10278 = vadd.f32 0.0, %v10277
  %v10279 = vpop.f32.mrf.mxu0
  %v10280 = vpop.f32.mrf.mxu0
  %v10281 = vadd.f32 0.0, %v10280
  %v10282 = vpop.f32.mrf.mxu0
  %10283 = vdwg.mxu0
  %10284 = vmatprep.subr.bf16.mxu0 0
  %10285 = vmatpush1.bf16.msra.mxu0 %v10210
  %10286 = vmatprep.subr.bf16.mxu0 0
  %10287 = vmatpush1.bf16.msra.mxu0 %v10209
  %10288 = vmatprep.subr.bf16.mxu0 0
  %10289 = vmatpush1.bf16.msra.mxu0 %v10208
  %10290 = vmatprep.subr.bf16.mxu0 0
  %10291 = vmatpush1.bf16.msra.mxu0 %v10207
  %10292 = vmatprep.subr.bf16.mxu0 0
  %10293 = vmatpush1.bf16.msra.mxu0 %v10206
  %10294 = vmatprep.subr.bf16.mxu0 0
  %10295 = vmatpush1.bf16.msra.mxu0 %v10205
  %10296 = vmatprep.subr.bf16.mxu0 0
  %10297 = vmatpush1.bf16.msra.mxu0 %v10204
  %10298 = vmatprep.subr.bf16.mxu0 0
  %10299 = vmatpush1.bf16.msra.mxu0 %v10203
  %10300 = vmatprep.subr.bf16.mxu0 0
  %10301 = vmatpush2.bf16.msra.mxu0 0
  %10302 = vmatprep.subr.bf16.mxu0 0
  %10303 = vmatpush2.bf16.msra.mxu0 0
  %10304 = vmatprep.subr.bf16.mxu0 0
  %10305 = vmatpush2.bf16.msra.mxu0 0
  %10306 = vmatprep.subr.bf16.mxu0 0
  %10307 = vmatpush2.bf16.msra.mxu0 0
  %10308 = vmatprep.subr.bf16.mxu0 0
  %10309 = vmatpush2.bf16.msra.mxu0 0
  %10310 = vmatprep.subr.bf16.mxu0 0
  %10311 = vmatpush2.bf16.msra.mxu0 0
  %10312 = vmatprep.subr.bf16.mxu0 0
  %10313 = vmatpush2.bf16.msra.mxu0 0
  %10314 = vmatprep.subr.bf16.mxu0 0
  %10315 = vmatpush2.bf16.msra.mxu0 0
  %10316 = vmatprep.mubr.bf16.mxu0 0
  %10317 = vmatmul.mubr.bf16.gmra.mxu0 %v9717
  %v10318 = vpop.f32.mrf.mxu0
  %v10319 = vadd.f32 %v10270, %v10318
  %v10320 = vpop.f32.mrf.mxu0
  %v10321 = vpop.f32.mrf.mxu0
  %v10322 = vadd.f32 %v10273, %v10321
  %v10323 = vpop.f32.mrf.mxu0
  %10324 = vmatprep.mubr.bf16.mxu0 0
  %10325 = vmatmul.mubr.bf16.gmra.mxu0 %v9720
  %v10326 = vpop.f32.mrf.mxu0
  %v10327 = vadd.f32 %v10278, %v10326
  %v10328 = vpop.f32.mrf.mxu0
  %v10329 = vpop.f32.mrf.mxu0
  %v10330 = vadd.f32 %v10281, %v10329
  %v10331 = vpop.f32.mrf.mxu0
  %10332 = vdwg.mxu0
  %v10333 = vadd.f32 %v10077, %v10319
  %v10334 = vadd.f32 %v10080, %v10322
  %v10335 = vadd.f32 %v10085, %v10327
  %v10336 = vadd.f32 %v10088, %v10330
  %v10337 = vadd.f32 %v9601, %v10333
  %v10338 = vadd.f32 %v9602, %v10334
  %v10339 = vadd.f32 %v9603, %v10335
  %v10340 = vadd.f32 %v9604, %v10336
  %v10341 = vld [vmem:[#allocation2 + $0xa8] sm:$0xff]
  %v10342 = vld [vmem:[#allocation2 + $0xb0] sm:$0xff]
  %v10343 = vld [vmem:[#allocation2 + $0xb8] sm:$0xff]
  %v10344 = vld [vmem:[#allocation2 + $0xc0] sm:$0xff]
  %v10345 = vld [vmem:[#allocation2 + $0xc8] sm:$0xff]
  %v10346 = vld [vmem:[#allocation2 + $0xd0] sm:$0xff]
  %v10347 = vld [vmem:[#allocation2 + $0xd8] sm:$0xff]
  %v10348 = vld [vmem:[#allocation2 + $0xe0] sm:$0xff]
  %v10349 = vld [vmem:[#allocation2 + $0xe8] sm:$0xff]
  %v10350 = vld [vmem:[#allocation2 + $0xf0] sm:$0xff]
  %v10351 = vld [vmem:[#allocation2 + $0xf8] sm:$0xff]
  %v10352 = vld [vmem:[#allocation2 + $0x100] sm:$0xff]
  %s10353 = scalar_lea.vmem %s5, 1344
  %v10354 = vld [vmem:[%s10353] sm:$0xf]
  %v10355 = vld [vmem:[%s10353 + $0x4] sm:$0xf]
  %v10356 = vld [vmem:[%s10353 + $0x8] sm:$0xf]
  %v10357 = vld [vmem:[%s10353 + $0xc] sm:$0xf]
  %v10358 = vld [vmem:[%s10353 + $0x10] sm:$0xf]
  %v10359 = vld [vmem:[%s10353 + $0x14] sm:$0xf]
  %v10360 = vld [vmem:[%s10353 + $0x18] sm:$0xf]
  %v10361 = vld [vmem:[%s10353 + $0x1c] sm:$0xf]
  %v10362 = vld [vmem:[%s10353 + $0x20] sm:$0xf]
  %v10363 = vld [vmem:[%s10353 + $0x24] sm:$0xf]
  %v10364 = vld [vmem:[%s10353 + $0x28] sm:$0xf]
  %v10365 = vld [vmem:[%s10353 + $0x2c] sm:$0xf]
  %v10366 = vld [vmem:[%s10353 + $0x30] sm:$0xf]
  %v10367 = vld [vmem:[%s10353 + $0x34] sm:$0xf]
  %v10368 = vld [vmem:[%s10353 + $0x38] sm:$0xf]
  %v10369 = vld [vmem:[%s10353 + $0x3c] sm:$0xf]
  %v10370 = vld [vmem:[%s10353 + $0x40] sm:$0xf]
  %v10371 = vld [vmem:[%s10353 + $0x44] sm:$0xf]
  %v10372 = vld [vmem:[%s10353 + $0x48] sm:$0xf]
  %v10373 = vld [vmem:[%s10353 + $0x4c] sm:$0xf]
  %v10374 = vld [vmem:[%s10353 + $0x50] sm:$0xf]
  %v10375 = vld [vmem:[%s10353 + $0x54] sm:$0xf]
  %v10376 = vld [vmem:[%s10353 + $0x58] sm:$0xf]
  %v10377 = vld [vmem:[%s10353 + $0x5c] sm:$0xf]
  %v10378 = vld [vmem:[%s10353 + $0x60] sm:$0xf]
  %v10379 = vld [vmem:[%s10353 + $0x64] sm:$0xf]
  %v10380 = vld [vmem:[%s10353 + $0x68] sm:$0xf]
  %v10381 = vld [vmem:[%s10353 + $0x6c] sm:$0xf]
  %v10382 = vld [vmem:[%s10353 + $0x70] sm:$0xf]
  %v10383 = vld [vmem:[%s10353 + $0x74] sm:$0xf]
  %v10384 = vld [vmem:[%s10353 + $0x78] sm:$0xf]
  %v10385 = vld [vmem:[%s10353 + $0x7c] sm:$0xf]
  %v10386 = vld [vmem:[%s10353 + $0x80] sm:$0xf]
  %v10387 = vld [vmem:[%s10353 + $0x84] sm:$0xf]
  %v10388 = vld [vmem:[%s10353 + $0x88] sm:$0xf]
  %v10389 = vld [vmem:[%s10353 + $0x8c] sm:$0xf]
  %v10390 = vld [vmem:[%s10353 + $0x90] sm:$0xf]
  %v10391 = vld [vmem:[%s10353 + $0x94] sm:$0xf]
  %v10392 = vld [vmem:[%s10353 + $0x98] sm:$0xf]
  %v10393 = vld [vmem:[%s10353 + $0x9c] sm:$0xf]
  %v10394 = vld [vmem:[%s10353 + $0xa0] sm:$0xf]
  %v10395 = vld [vmem:[%s10353 + $0xa4] sm:$0xf]
  %v10396 = vld [vmem:[%s10353 + $0xa8] sm:$0xf]
  %v10397 = vld [vmem:[%s10353 + $0xac] sm:$0xf]
  %v10398 = vld [vmem:[%s10353 + $0xb0] sm:$0xf]
  %v10399 = vld [vmem:[%s10353 + $0xb4] sm:$0xf]
  %v10400 = vld [vmem:[%s10353 + $0xb8] sm:$0xf]
  %v10401 = vld [vmem:[%s10353 + $0xbc] sm:$0xf]
  %s10402 = scalar_lea.vmem %s6, 1344
  %v10403 = vld [vmem:[%s10402] sm:$0xf]
  %v10404 = vld [vmem:[%s10402 + $0x4] sm:$0xf]
  %v10405 = vld [vmem:[%s10402 + $0x8] sm:$0xf]
  %v10406 = vld [vmem:[%s10402 + $0xc] sm:$0xf]
  %v10407 = vld [vmem:[%s10402 + $0x10] sm:$0xf]
  %v10408 = vld [vmem:[%s10402 + $0x14] sm:$0xf]
  %v10409 = vld [vmem:[%s10402 + $0x18] sm:$0xf]
  %v10410 = vld [vmem:[%s10402 + $0x1c] sm:$0xf]
  %v10411 = vld [vmem:[%s10402 + $0x20] sm:$0xf]
  %v10412 = vld [vmem:[%s10402 + $0x24] sm:$0xf]
  %v10413 = vld [vmem:[%s10402 + $0x28] sm:$0xf]
  %v10414 = vld [vmem:[%s10402 + $0x2c] sm:$0xf]
  %v10415 = vld [vmem:[%s10402 + $0x30] sm:$0xf]
  %v10416 = vld [vmem:[%s10402 + $0x34] sm:$0xf]
  %v10417 = vld [vmem:[%s10402 + $0x38] sm:$0xf]
  %v10418 = vld [vmem:[%s10402 + $0x3c] sm:$0xf]
  %v10419 = vld [vmem:[%s10402 + $0x40] sm:$0xf]
  %v10420 = vld [vmem:[%s10402 + $0x44] sm:$0xf]
  %v10421 = vld [vmem:[%s10402 + $0x48] sm:$0xf]
  %v10422 = vld [vmem:[%s10402 + $0x4c] sm:$0xf]
  %v10423 = vld [vmem:[%s10402 + $0x50] sm:$0xf]
  %v10424 = vld [vmem:[%s10402 + $0x54] sm:$0xf]
  %v10425 = vld [vmem:[%s10402 + $0x58] sm:$0xf]
  %v10426 = vld [vmem:[%s10402 + $0x5c] sm:$0xf]
  %v10427 = vld [vmem:[%s10402 + $0x60] sm:$0xf]
  %v10428 = vld [vmem:[%s10402 + $0x64] sm:$0xf]
  %v10429 = vld [vmem:[%s10402 + $0x68] sm:$0xf]
  %v10430 = vld [vmem:[%s10402 + $0x6c] sm:$0xf]
  %v10431 = vld [vmem:[%s10402 + $0x70] sm:$0xf]
  %v10432 = vld [vmem:[%s10402 + $0x74] sm:$0xf]
  %v10433 = vld [vmem:[%s10402 + $0x78] sm:$0xf]
  %v10434 = vld [vmem:[%s10402 + $0x7c] sm:$0xf]
  %v10435 = vld [vmem:[%s10402 + $0x80] sm:$0xf]
  %v10436 = vld [vmem:[%s10402 + $0x84] sm:$0xf]
  %v10437 = vld [vmem:[%s10402 + $0x88] sm:$0xf]
  %v10438 = vld [vmem:[%s10402 + $0x8c] sm:$0xf]
  %v10439 = vld [vmem:[%s10402 + $0x90] sm:$0xf]
  %v10440 = vld [vmem:[%s10402 + $0x94] sm:$0xf]
  %v10441 = vld [vmem:[%s10402 + $0x98] sm:$0xf]
  %v10442 = vld [vmem:[%s10402 + $0x9c] sm:$0xf]
  %v10443 = vld [vmem:[%s10402 + $0xa0] sm:$0xf]
  %v10444 = vld [vmem:[%s10402 + $0xa4] sm:$0xf]
  %v10445 = vld [vmem:[%s10402 + $0xa8] sm:$0xf]
  %v10446 = vld [vmem:[%s10402 + $0xac] sm:$0xf]
  %v10447 = vld [vmem:[%s10402 + $0xb0] sm:$0xf]
  %v10448 = vld [vmem:[%s10402 + $0xb4] sm:$0xf]
  %v10449 = vld [vmem:[%s10402 + $0xb8] sm:$0xf]
  %v10450 = vld [vmem:[%s10402 + $0xbc] sm:$0xf]
  %v10451 = vpack.c.bf16 %v10344, %v10341
  %v10452 = vpack.c.bf16 %v10345, %v10342
  %v10453 = vpack.c.bf16 %v10346, %v10343
  %v10454 = vpack.c.bf16 %v10350, %v10347
  %v10455 = vpack.c.bf16 %v10351, %v10348
  %v10456 = vpack.c.bf16 %v10352, %v10349
  %v10457 = vunpack.c.l.bf16 %v10451
  %v10458 = vunpack.c.l.bf16 %v10452
  %v10459 = vunpack.c.l.bf16 %v10453
  %v10460 = vunpack.c.h.bf16 %v10451
  %v10461 = vunpack.c.h.bf16 %v10452
  %v10462 = vunpack.c.h.bf16 %v10453
  %v10463 = vunpack.c.l.bf16 %v10454
  %v10464 = vunpack.c.l.bf16 %v10455
  %v10465 = vunpack.c.l.bf16 %v10456
  %v10466 = vunpack.c.h.bf16 %v10454
  %v10467 = vunpack.c.h.bf16 %v10455
  %v10468 = vunpack.c.h.bf16 %v10456
  %v10469 = vsub.f32 %v10341, %v10457
  %v10470 = vsub.f32 %v10342, %v10458
  %v10471 = vsub.f32 %v10343, %v10459
  %v10472 = vsub.f32 %v10344, %v10460
  %v10473 = vsub.f32 %v10345, %v10461
  %v10474 = vsub.f32 %v10346, %v10462
  %v10475 = vsub.f32 %v10347, %v10463
  %v10476 = vsub.f32 %v10348, %v10464
  %v10477 = vsub.f32 %v10349, %v10465
  %v10478 = vsub.f32 %v10350, %v10466
  %v10479 = vsub.f32 %v10351, %v10467
  %v10480 = vsub.f32 %v10352, %v10468
  %v10481 = vpack.c.bf16 %v10472, %v10469
  %v10482 = vpack.c.bf16 %v10473, %v10470
  %v10483 = vpack.c.bf16 %v10474, %v10471
  %v10484 = vpack.c.bf16 %v10478, %v10475
  %v10485 = vpack.c.bf16 %v10479, %v10476
  %v10486 = vpack.c.bf16 %v10480, %v10477
  %v10535 = vunpack.c.l.b16 %v10354
  %v10536 = vunpack.c.l.b16 %v10355
  %v10537 = vunpack.c.l.b16 %v10356
  %v10538 = vunpack.c.l.b16 %v10357
  %v10539 = vunpack.c.l.b16 %v10358
  %v10540 = vunpack.c.l.b16 %v10359
  %v10541 = vunpack.c.l.b16 %v10360
  %v10542 = vunpack.c.l.b16 %v10361
  %v10543 = vunpack.c.l.b16 %v10362
  %v10544 = vunpack.c.l.b16 %v10363
  %v10545 = vunpack.c.l.b16 %v10364
  %v10546 = vunpack.c.l.b16 %v10365
  %v10547 = vunpack.c.l.b16 %v10366
  %v10548 = vunpack.c.l.b16 %v10367
  %v10549 = vunpack.c.l.b16 %v10368
  %v10550 = vunpack.c.l.b16 %v10369
  %v10551 = vunpack.c.l.b16 %v10370
  %v10552 = vunpack.c.l.b16 %v10371
  %v10553 = vunpack.c.l.b16 %v10372
  %v10554 = vunpack.c.l.b16 %v10373
  %v10555 = vunpack.c.l.b16 %v10374
  %v10556 = vunpack.c.l.b16 %v10375
  %v10557 = vunpack.c.l.b16 %v10376
  %v10558 = vunpack.c.l.b16 %v10377
  %v10559 = vunpack.c.l.b16 %v10378
  %v10560 = vunpack.c.l.b16 %v10379
  %v10561 = vunpack.c.l.b16 %v10380
  %v10562 = vunpack.c.l.b16 %v10381
  %v10563 = vunpack.c.l.b16 %v10382
  %v10564 = vunpack.c.l.b16 %v10383
  %v10565 = vunpack.c.l.b16 %v10384
  %v10566 = vunpack.c.l.b16 %v10385
  %v10567 = vunpack.c.l.b16 %v10386
  %v10568 = vunpack.c.l.b16 %v10387
  %v10569 = vunpack.c.l.b16 %v10388
  %v10570 = vunpack.c.l.b16 %v10389
  %v10571 = vunpack.c.l.b16 %v10390
  %v10572 = vunpack.c.l.b16 %v10391
  %v10573 = vunpack.c.l.b16 %v10392
  %v10574 = vunpack.c.l.b16 %v10393
  %v10575 = vunpack.c.l.b16 %v10394
  %v10576 = vunpack.c.l.b16 %v10395
  %v10577 = vunpack.c.l.b16 %v10396
  %v10578 = vunpack.c.l.b16 %v10397
  %v10579 = vunpack.c.l.b16 %v10398
  %v10580 = vunpack.c.l.b16 %v10399
  %v10581 = vunpack.c.l.b16 %v10400
  %v10582 = vunpack.c.l.b16 %v10401
  %v10583 = vpack.c.b16 %v10536, %v10535
  %v10584 = vpack.c.b16 %v10538, %v10537
  %v10585 = vpack.c.b16 %v10540, %v10539
  %v10586 = vpack.c.b16 %v10542, %v10541
  %v10587 = vpack.c.b16 %v10544, %v10543
  %v10588 = vpack.c.b16 %v10546, %v10545
  %v10589 = vpack.c.b16 %v10548, %v10547
  %v10590 = vpack.c.b16 %v10550, %v10549
  %v10591 = vpack.c.b16 %v10552, %v10551
  %v10592 = vpack.c.b16 %v10554, %v10553
  %v10593 = vpack.c.b16 %v10556, %v10555
  %v10594 = vpack.c.b16 %v10558, %v10557
  %v10595 = vpack.c.b16 %v10560, %v10559
  %v10596 = vpack.c.b16 %v10562, %v10561
  %v10597 = vpack.c.b16 %v10564, %v10563
  %v10598 = vpack.c.b16 %v10566, %v10565
  %v10599 = vpack.c.b16 %v10568, %v10567
  %v10600 = vpack.c.b16 %v10570, %v10569
  %v10601 = vpack.c.b16 %v10572, %v10571
  %v10602 = vpack.c.b16 %v10574, %v10573
  %v10603 = vpack.c.b16 %v10576, %v10575
  %v10604 = vpack.c.b16 %v10578, %v10577
  %v10605 = vpack.c.b16 %v10580, %v10579
  %v10606 = vpack.c.b16 %v10582, %v10581
  %10631 = vmatprep.subr.bf16.mxu0 0
  %10632 = vmatpush1.bf16.msra.mxu0 %v10590
  %10633 = vmatprep.subr.bf16.mxu0 0
  %10634 = vmatpush1.bf16.msra.mxu0 %v10589
  %10635 = vmatprep.subr.bf16.mxu0 0
  %10636 = vmatpush1.bf16.msra.mxu0 %v10588
  %10637 = vmatprep.subr.bf16.mxu0 0
  %10638 = vmatpush1.bf16.msra.mxu0 %v10587
  %10639 = vmatprep.subr.bf16.mxu0 0
  %10640 = vmatpush1.bf16.msra.mxu0 %v10586
  %10641 = vmatprep.subr.bf16.mxu0 0
  %10642 = vmatpush1.bf16.msra.mxu0 %v10585
  %10643 = vmatprep.subr.bf16.mxu0 0
  %10644 = vmatpush1.bf16.msra.mxu0 %v10584
  %10645 = vmatprep.subr.bf16.mxu0 0
  %10646 = vmatpush1.bf16.msra.mxu0 %v10583
  %10647 = vmatprep.subr.bf16.mxu0 0
  %10648 = vmatpush2.bf16.msra.mxu0 %v10598
  %10649 = vmatprep.subr.bf16.mxu0 0
  %10650 = vmatpush2.bf16.msra.mxu0 %v10597
  %10651 = vmatprep.subr.bf16.mxu0 0
  %10652 = vmatpush2.bf16.msra.mxu0 %v10596
  %10653 = vmatprep.subr.bf16.mxu0 0
  %10654 = vmatpush2.bf16.msra.mxu0 %v10595
  %10655 = vmatprep.subr.bf16.mxu0 0
  %10656 = vmatpush2.bf16.msra.mxu0 %v10594
  %10657 = vmatprep.subr.bf16.mxu0 0
  %10658 = vmatpush2.bf16.msra.mxu0 %v10593
  %10659 = vmatprep.subr.bf16.mxu0 0
  %10660 = vmatpush2.bf16.msra.mxu0 %v10592
  %10661 = vmatprep.subr.bf16.mxu0 0
  %10662 = vmatpush2.bf16.msra.mxu0 %v10591
  %10663 = vmatprep.mubr.bf16.mxu0 %v10482
  %10664 = vmatmul.mubr.bf16.gmra.mxu0 %v10481
  %v10665 = vpop.f32.mrf.mxu0
  %v10666 = vadd.f32 0.0, %v10665
  %v10667 = vpop.f32.mrf.mxu0
  %v10668 = vpop.f32.mrf.mxu0
  %v10669 = vadd.f32 0.0, %v10668
  %v10670 = vpop.f32.mrf.mxu0
  %10671 = vmatprep.mubr.bf16.mxu0 %v10485
  %10672 = vmatmul.mubr.bf16.gmra.mxu0 %v10484
  %v10673 = vpop.f32.mrf.mxu0
  %v10674 = vadd.f32 0.0, %v10673
  %v10675 = vpop.f32.mrf.mxu0
  %v10676 = vpop.f32.mrf.mxu0
  %v10677 = vadd.f32 0.0, %v10676
  %v10678 = vpop.f32.mrf.mxu0
  %10679 = vdwg.mxu0
  %10680 = vmatprep.subr.bf16.mxu0 0
  %10681 = vmatpush1.bf16.msra.mxu0 %v10606
  %10682 = vmatprep.subr.bf16.mxu0 0
  %10683 = vmatpush1.bf16.msra.mxu0 %v10605
  %10684 = vmatprep.subr.bf16.mxu0 0
  %10685 = vmatpush1.bf16.msra.mxu0 %v10604
  %10686 = vmatprep.subr.bf16.mxu0 0
  %10687 = vmatpush1.bf16.msra.mxu0 %v10603
  %10688 = vmatprep.subr.bf16.mxu0 0
  %10689 = vmatpush1.bf16.msra.mxu0 %v10602
  %10690 = vmatprep.subr.bf16.mxu0 0
  %10691 = vmatpush1.bf16.msra.mxu0 %v10601
  %10692 = vmatprep.subr.bf16.mxu0 0
  %10693 = vmatpush1.bf16.msra.mxu0 %v10600
  %10694 = vmatprep.subr.bf16.mxu0 0
  %10695 = vmatpush1.bf16.msra.mxu0 %v10599
  %10696 = vmatprep.subr.bf16.mxu0 0
  %10697 = vmatpush2.bf16.msra.mxu0 0
  %10698 = vmatprep.subr.bf16.mxu0 0
  %10699 = vmatpush2.bf16.msra.mxu0 0
  %10700 = vmatprep.subr.bf16.mxu0 0
  %10701 = vmatpush2.bf16.msra.mxu0 0
  %10702 = vmatprep.subr.bf16.mxu0 0
  %10703 = vmatpush2.bf16.msra.mxu0 0
  %10704 = vmatprep.subr.bf16.mxu0 0
  %10705 = vmatpush2.bf16.msra.mxu0 0
  %10706 = vmatprep.subr.bf16.mxu0 0
  %10707 = vmatpush2.bf16.msra.mxu0 0
  %10708 = vmatprep.subr.bf16.mxu0 0
  %10709 = vmatpush2.bf16.msra.mxu0 0
  %10710 = vmatprep.subr.bf16.mxu0 0
  %10711 = vmatpush2.bf16.msra.mxu0 0
  %10712 = vmatprep.mubr.bf16.mxu0 0
  %10713 = vmatmul.mubr.bf16.gmra.mxu0 %v10483
  %v10714 = vpop.f32.mrf.mxu0
  %v10715 = vadd.f32 %v10666, %v10714
  %v10716 = vpop.f32.mrf.mxu0
  %v10717 = vpop.f32.mrf.mxu0
  %v10718 = vadd.f32 %v10669, %v10717
  %v10719 = vpop.f32.mrf.mxu0
  %10720 = vmatprep.mubr.bf16.mxu0 0
  %10721 = vmatmul.mubr.bf16.gmra.mxu0 %v10486
  %v10722 = vpop.f32.mrf.mxu0
  %v10723 = vadd.f32 %v10674, %v10722
  %v10724 = vpop.f32.mrf.mxu0
  %v10725 = vpop.f32.mrf.mxu0
  %v10726 = vadd.f32 %v10677, %v10725
  %v10727 = vpop.f32.mrf.mxu0
  %10728 = vdwg.mxu0
  %10729 = vmatprep.subr.bf16.mxu0 0
  %10730 = vmatpush1.bf16.msra.mxu0 %v10590
  %10731 = vmatprep.subr.bf16.mxu0 0
  %10732 = vmatpush1.bf16.msra.mxu0 %v10589
  %10733 = vmatprep.subr.bf16.mxu0 0
  %10734 = vmatpush1.bf16.msra.mxu0 %v10588
  %10735 = vmatprep.subr.bf16.mxu0 0
  %10736 = vmatpush1.bf16.msra.mxu0 %v10587
  %10737 = vmatprep.subr.bf16.mxu0 0
  %10738 = vmatpush1.bf16.msra.mxu0 %v10586
  %10739 = vmatprep.subr.bf16.mxu0 0
  %10740 = vmatpush1.bf16.msra.mxu0 %v10585
  %10741 = vmatprep.subr.bf16.mxu0 0
  %10742 = vmatpush1.bf16.msra.mxu0 %v10584
  %10743 = vmatprep.subr.bf16.mxu0 0
  %10744 = vmatpush1.bf16.msra.mxu0 %v10583
  %10745 = vmatprep.subr.bf16.mxu0 0
  %10746 = vmatpush2.bf16.msra.mxu0 %v10598
  %10747 = vmatprep.subr.bf16.mxu0 0
  %10748 = vmatpush2.bf16.msra.mxu0 %v10597
  %10749 = vmatprep.subr.bf16.mxu0 0
  %10750 = vmatpush2.bf16.msra.mxu0 %v10596
  %10751 = vmatprep.subr.bf16.mxu0 0
  %10752 = vmatpush2.bf16.msra.mxu0 %v10595
  %10753 = vmatprep.subr.bf16.mxu0 0
  %10754 = vmatpush2.bf16.msra.mxu0 %v10594
  %10755 = vmatprep.subr.bf16.mxu0 0
  %10756 = vmatpush2.bf16.msra.mxu0 %v10593
  %10757 = vmatprep.subr.bf16.mxu0 0
  %10758 = vmatpush2.bf16.msra.mxu0 %v10592
  %10759 = vmatprep.subr.bf16.mxu0 0
  %10760 = vmatpush2.bf16.msra.mxu0 %v10591
  %10761 = vmatprep.mubr.bf16.mxu0 %v10452
  %10762 = vmatmul.mubr.bf16.gmra.mxu0 %v10451
  %v10763 = vpop.f32.mrf.mxu0
  %v10764 = vadd.f32 %v10715, %v10763
  %v10765 = vpop.f32.mrf.mxu0
  %v10766 = vpop.f32.mrf.mxu0
  %v10767 = vadd.f32 %v10718, %v10766
  %v10768 = vpop.f32.mrf.mxu0
  %10769 = vmatprep.mubr.bf16.mxu0 %v10455
  %10770 = vmatmul.mubr.bf16.gmra.mxu0 %v10454
  %v10771 = vpop.f32.mrf.mxu0
  %v10772 = vadd.f32 %v10723, %v10771
  %v10773 = vpop.f32.mrf.mxu0
  %v10774 = vpop.f32.mrf.mxu0
  %v10775 = vadd.f32 %v10726, %v10774
  %v10776 = vpop.f32.mrf.mxu0
  %10777 = vdwg.mxu0
  %10778 = vmatprep.subr.bf16.mxu0 0
  %10779 = vmatpush1.bf16.msra.mxu0 %v10606
  %10780 = vmatprep.subr.bf16.mxu0 0
  %10781 = vmatpush1.bf16.msra.mxu0 %v10605
  %10782 = vmatprep.subr.bf16.mxu0 0
  %10783 = vmatpush1.bf16.msra.mxu0 %v10604
  %10784 = vmatprep.subr.bf16.mxu0 0
  %10785 = vmatpush1.bf16.msra.mxu0 %v10603
  %10786 = vmatprep.subr.bf16.mxu0 0
  %10787 = vmatpush1.bf16.msra.mxu0 %v10602
  %10788 = vmatprep.subr.bf16.mxu0 0
  %10789 = vmatpush1.bf16.msra.mxu0 %v10601
  %10790 = vmatprep.subr.bf16.mxu0 0
  %10791 = vmatpush1.bf16.msra.mxu0 %v10600
  %10792 = vmatprep.subr.bf16.mxu0 0
  %10793 = vmatpush1.bf16.msra.mxu0 %v10599
  %10794 = vmatprep.subr.bf16.mxu0 0
  %10795 = vmatpush2.bf16.msra.mxu0 0
  %10796 = vmatprep.subr.bf16.mxu0 0
  %10797 = vmatpush2.bf16.msra.mxu0 0
  %10798 = vmatprep.subr.bf16.mxu0 0
  %10799 = vmatpush2.bf16.msra.mxu0 0
  %10800 = vmatprep.subr.bf16.mxu0 0
  %10801 = vmatpush2.bf16.msra.mxu0 0
  %10802 = vmatprep.subr.bf16.mxu0 0
  %10803 = vmatpush2.bf16.msra.mxu0 0
  %10804 = vmatprep.subr.bf16.mxu0 0
  %10805 = vmatpush2.bf16.msra.mxu0 0
  %10806 = vmatprep.subr.bf16.mxu0 0
  %10807 = vmatpush2.bf16.msra.mxu0 0
  %10808 = vmatprep.subr.bf16.mxu0 0
  %10809 = vmatpush2.bf16.msra.mxu0 0
  %10810 = vmatprep.mubr.bf16.mxu0 0
  %10811 = vmatmul.mubr.bf16.gmra.mxu0 %v10453
  %v10812 = vpop.f32.mrf.mxu0
  %v10813 = vadd.f32 %v10764, %v10812
  %v10814 = vpop.f32.mrf.mxu0
  %v10815 = vpop.f32.mrf.mxu0
  %v10816 = vadd.f32 %v10767, %v10815
  %v10817 = vpop.f32.mrf.mxu0
  %10818 = vmatprep.mubr.bf16.mxu0 0
  %10819 = vmatmul.mubr.bf16.gmra.mxu0 %v10456
  %v10820 = vpop.f32.mrf.mxu0
  %v10821 = vadd.f32 %v10772, %v10820
  %v10822 = vpop.f32.mrf.mxu0
  %v10823 = vpop.f32.mrf.mxu0
  %v10824 = vadd.f32 %v10775, %v10823
  %v10825 = vpop.f32.mrf.mxu0
  %10826 = vdwg.mxu0
  %v10875 = vunpack.c.l.b16 %v10403
  %v10876 = vunpack.c.l.b16 %v10404
  %v10877 = vunpack.c.l.b16 %v10405
  %v10878 = vunpack.c.l.b16 %v10406
  %v10879 = vunpack.c.l.b16 %v10407
  %v10880 = vunpack.c.l.b16 %v10408
  %v10881 = vunpack.c.l.b16 %v10409
  %v10882 = vunpack.c.l.b16 %v10410
  %v10883 = vunpack.c.l.b16 %v10411
  %v10884 = vunpack.c.l.b16 %v10412
  %v10885 = vunpack.c.l.b16 %v10413
  %v10886 = vunpack.c.l.b16 %v10414
  %v10887 = vunpack.c.l.b16 %v10415
  %v10888 = vunpack.c.l.b16 %v10416
  %v10889 = vunpack.c.l.b16 %v10417
  %v10890 = vunpack.c.l.b16 %v10418
  %v10891 = vunpack.c.l.b16 %v10419
  %v10892 = vunpack.c.l.b16 %v10420
  %v10893 = vunpack.c.l.b16 %v10421
  %v10894 = vunpack.c.l.b16 %v10422
  %v10895 = vunpack.c.l.b16 %v10423
  %v10896 = vunpack.c.l.b16 %v10424
  %v10897 = vunpack.c.l.b16 %v10425
  %v10898 = vunpack.c.l.b16 %v10426
  %v10899 = vunpack.c.l.b16 %v10427
  %v10900 = vunpack.c.l.b16 %v10428
  %v10901 = vunpack.c.l.b16 %v10429
  %v10902 = vunpack.c.l.b16 %v10430
  %v10903 = vunpack.c.l.b16 %v10431
  %v10904 = vunpack.c.l.b16 %v10432
  %v10905 = vunpack.c.l.b16 %v10433
  %v10906 = vunpack.c.l.b16 %v10434
  %v10907 = vunpack.c.l.b16 %v10435
  %v10908 = vunpack.c.l.b16 %v10436
  %v10909 = vunpack.c.l.b16 %v10437
  %v10910 = vunpack.c.l.b16 %v10438
  %v10911 = vunpack.c.l.b16 %v10439
  %v10912 = vunpack.c.l.b16 %v10440
  %v10913 = vunpack.c.l.b16 %v10441
  %v10914 = vunpack.c.l.b16 %v10442
  %v10915 = vunpack.c.l.b16 %v10443
  %v10916 = vunpack.c.l.b16 %v10444
  %v10917 = vunpack.c.l.b16 %v10445
  %v10918 = vunpack.c.l.b16 %v10446
  %v10919 = vunpack.c.l.b16 %v10447
  %v10920 = vunpack.c.l.b16 %v10448
  %v10921 = vunpack.c.l.b16 %v10449
  %v10922 = vunpack.c.l.b16 %v10450
  %v10923 = vpack.c.b16 %v10876, %v10875
  %v10924 = vpack.c.b16 %v10878, %v10877
  %v10925 = vpack.c.b16 %v10880, %v10879
  %v10926 = vpack.c.b16 %v10882, %v10881
  %v10927 = vpack.c.b16 %v10884, %v10883
  %v10928 = vpack.c.b16 %v10886, %v10885
  %v10929 = vpack.c.b16 %v10888, %v10887
  %v10930 = vpack.c.b16 %v10890, %v10889
  %v10931 = vpack.c.b16 %v10892, %v10891
  %v10932 = vpack.c.b16 %v10894, %v10893
  %v10933 = vpack.c.b16 %v10896, %v10895
  %v10934 = vpack.c.b16 %v10898, %v10897
  %v10935 = vpack.c.b16 %v10900, %v10899
  %v10936 = vpack.c.b16 %v10902, %v10901
  %v10937 = vpack.c.b16 %v10904, %v10903
  %v10938 = vpack.c.b16 %v10906, %v10905
  %v10939 = vpack.c.b16 %v10908, %v10907
  %v10940 = vpack.c.b16 %v10910, %v10909
  %v10941 = vpack.c.b16 %v10912, %v10911
  %v10942 = vpack.c.b16 %v10914, %v10913
  %v10943 = vpack.c.b16 %v10916, %v10915
  %v10944 = vpack.c.b16 %v10918, %v10917
  %v10945 = vpack.c.b16 %v10920, %v10919
  %v10946 = vpack.c.b16 %v10922, %v10921
  %10971 = vmatprep.subr.bf16.mxu0 0
  %10972 = vmatpush1.bf16.msra.mxu0 %v10930
  %10973 = vmatprep.subr.bf16.mxu0 0
  %10974 = vmatpush1.bf16.msra.mxu0 %v10929
  %10975 = vmatprep.subr.bf16.mxu0 0
  %10976 = vmatpush1.bf16.msra.mxu0 %v10928
  %10977 = vmatprep.subr.bf16.mxu0 0
  %10978 = vmatpush1.bf16.msra.mxu0 %v10927
  %10979 = vmatprep.subr.bf16.mxu0 0
  %10980 = vmatpush1.bf16.msra.mxu0 %v10926
  %10981 = vmatprep.subr.bf16.mxu0 0
  %10982 = vmatpush1.bf16.msra.mxu0 %v10925
  %10983 = vmatprep.subr.bf16.mxu0 0
  %10984 = vmatpush1.bf16.msra.mxu0 %v10924
  %10985 = vmatprep.subr.bf16.mxu0 0
  %10986 = vmatpush1.bf16.msra.mxu0 %v10923
  %10987 = vmatprep.subr.bf16.mxu0 0
  %10988 = vmatpush2.bf16.msra.mxu0 %v10938
  %10989 = vmatprep.subr.bf16.mxu0 0
  %10990 = vmatpush2.bf16.msra.mxu0 %v10937
  %10991 = vmatprep.subr.bf16.mxu0 0
  %10992 = vmatpush2.bf16.msra.mxu0 %v10936
  %10993 = vmatprep.subr.bf16.mxu0 0
  %10994 = vmatpush2.bf16.msra.mxu0 %v10935
  %10995 = vmatprep.subr.bf16.mxu0 0
  %10996 = vmatpush2.bf16.msra.mxu0 %v10934
  %10997 = vmatprep.subr.bf16.mxu0 0
  %10998 = vmatpush2.bf16.msra.mxu0 %v10933
  %10999 = vmatprep.subr.bf16.mxu0 0
  %11000 = vmatpush2.bf16.msra.mxu0 %v10932
  %11001 = vmatprep.subr.bf16.mxu0 0
  %11002 = vmatpush2.bf16.msra.mxu0 %v10931
  %11003 = vmatprep.mubr.bf16.mxu0 %v10452
  %11004 = vmatmul.mubr.bf16.gmra.mxu0 %v10451
  %v11005 = vpop.f32.mrf.mxu0
  %v11006 = vadd.f32 0.0, %v11005
  %v11007 = vpop.f32.mrf.mxu0
  %v11008 = vpop.f32.mrf.mxu0
  %v11009 = vadd.f32 0.0, %v11008
  %v11010 = vpop.f32.mrf.mxu0
  %11011 = vmatprep.mubr.bf16.mxu0 %v10455
  %11012 = vmatmul.mubr.bf16.gmra.mxu0 %v10454
  %v11013 = vpop.f32.mrf.mxu0
  %v11014 = vadd.f32 0.0, %v11013
  %v11015 = vpop.f32.mrf.mxu0
  %v11016 = vpop.f32.mrf.mxu0
  %v11017 = vadd.f32 0.0, %v11016
  %v11018 = vpop.f32.mrf.mxu0
  %11019 = vdwg.mxu0
  %11020 = vmatprep.subr.bf16.mxu0 0
  %11021 = vmatpush1.bf16.msra.mxu0 %v10946
  %11022 = vmatprep.subr.bf16.mxu0 0
  %11023 = vmatpush1.bf16.msra.mxu0 %v10945
  %11024 = vmatprep.subr.bf16.mxu0 0
  %11025 = vmatpush1.bf16.msra.mxu0 %v10944
  %11026 = vmatprep.subr.bf16.mxu0 0
  %11027 = vmatpush1.bf16.msra.mxu0 %v10943
  %11028 = vmatprep.subr.bf16.mxu0 0
  %11029 = vmatpush1.bf16.msra.mxu0 %v10942
  %11030 = vmatprep.subr.bf16.mxu0 0
  %11031 = vmatpush1.bf16.msra.mxu0 %v10941
  %11032 = vmatprep.subr.bf16.mxu0 0
  %11033 = vmatpush1.bf16.msra.mxu0 %v10940
  %11034 = vmatprep.subr.bf16.mxu0 0
  %11035 = vmatpush1.bf16.msra.mxu0 %v10939
  %11036 = vmatprep.subr.bf16.mxu0 0
  %11037 = vmatpush2.bf16.msra.mxu0 0
  %11038 = vmatprep.subr.bf16.mxu0 0
  %11039 = vmatpush2.bf16.msra.mxu0 0
  %11040 = vmatprep.subr.bf16.mxu0 0
  %11041 = vmatpush2.bf16.msra.mxu0 0
  %11042 = vmatprep.subr.bf16.mxu0 0
  %11043 = vmatpush2.bf16.msra.mxu0 0
  %11044 = vmatprep.subr.bf16.mxu0 0
  %11045 = vmatpush2.bf16.msra.mxu0 0
  %11046 = vmatprep.subr.bf16.mxu0 0
  %11047 = vmatpush2.bf16.msra.mxu0 0
  %11048 = vmatprep.subr.bf16.mxu0 0
  %11049 = vmatpush2.bf16.msra.mxu0 0
  %11050 = vmatprep.subr.bf16.mxu0 0
  %11051 = vmatpush2.bf16.msra.mxu0 0
  %11052 = vmatprep.mubr.bf16.mxu0 0
  %11053 = vmatmul.mubr.bf16.gmra.mxu0 %v10453
  %v11054 = vpop.f32.mrf.mxu0
  %v11055 = vadd.f32 %v11006, %v11054
  %v11056 = vpop.f32.mrf.mxu0
  %v11057 = vpop.f32.mrf.mxu0
  %v11058 = vadd.f32 %v11009, %v11057
  %v11059 = vpop.f32.mrf.mxu0
  %11060 = vmatprep.mubr.bf16.mxu0 0
  %11061 = vmatmul.mubr.bf16.gmra.mxu0 %v10456
  %v11062 = vpop.f32.mrf.mxu0
  %v11063 = vadd.f32 %v11014, %v11062
  %v11064 = vpop.f32.mrf.mxu0
  %v11065 = vpop.f32.mrf.mxu0
  %v11066 = vadd.f32 %v11017, %v11065
  %v11067 = vpop.f32.mrf.mxu0
  %11068 = vdwg.mxu0
  %v11069 = vadd.f32 %v10813, %v11055
  %v11070 = vadd.f32 %v10816, %v11058
  %v11071 = vadd.f32 %v10821, %v11063
  %v11072 = vadd.f32 %v10824, %v11066
  %v11073 = vadd.f32 %v10337, %v11069
  %v11074 = vadd.f32 %v10338, %v11070
  %v11075 = vadd.f32 %v10339, %v11071
  %v11076 = vadd.f32 %v10340, %v11072
  %v11077 = vld [vmem:[#allocation2 + $0xc0] sm:$0xff]
  %v11078 = vld [vmem:[#allocation2 + $0xc8] sm:$0xff]
  %v11079 = vld [vmem:[#allocation2 + $0xd0] sm:$0xff]
  %v11080 = vld [vmem:[#allocation2 + $0xd8] sm:$0xff]
  %v11081 = vld [vmem:[#allocation2 + $0xe0] sm:$0xff]
  %v11082 = vld [vmem:[#allocation2 + $0xe8] sm:$0xff]
  %v11083 = vld [vmem:[#allocation2 + $0xf0] sm:$0xff]
  %v11084 = vld [vmem:[#allocation2 + $0xf8] sm:$0xff]
  %v11085 = vld [vmem:[#allocation2 + $0x100] sm:$0xff]
  %v11086 = vld [vmem:[#allocation2 + $0x108] sm:$0xff]
  %v11087 = vld [vmem:[#allocation2 + $0x110] sm:$0xff]
  %v11088 = vld [vmem:[#allocation2 + $0x118] sm:$0xff]
  %s11089 = scalar_lea.vmem %s5, 1536
  %v11090 = vld [vmem:[%s11089] sm:$0xf]
  %v11091 = vld [vmem:[%s11089 + $0x4] sm:$0xf]
  %v11092 = vld [vmem:[%s11089 + $0x8] sm:$0xf]
  %v11093 = vld [vmem:[%s11089 + $0xc] sm:$0xf]
  %v11094 = vld [vmem:[%s11089 + $0x10] sm:$0xf]
  %v11095 = vld [vmem:[%s11089 + $0x14] sm:$0xf]
  %v11096 = vld [vmem:[%s11089 + $0x18] sm:$0xf]
  %v11097 = vld [vmem:[%s11089 + $0x1c] sm:$0xf]
  %v11098 = vld [vmem:[%s11089 + $0x20] sm:$0xf]
  %v11099 = vld [vmem:[%s11089 + $0x24] sm:$0xf]
  %v11100 = vld [vmem:[%s11089 + $0x28] sm:$0xf]
  %v11101 = vld [vmem:[%s11089 + $0x2c] sm:$0xf]
  %v11102 = vld [vmem:[%s11089 + $0x30] sm:$0xf]
  %v11103 = vld [vmem:[%s11089 + $0x34] sm:$0xf]
  %v11104 = vld [vmem:[%s11089 + $0x38] sm:$0xf]
  %v11105 = vld [vmem:[%s11089 + $0x3c] sm:$0xf]
  %v11106 = vld [vmem:[%s11089 + $0x40] sm:$0xf]
  %v11107 = vld [vmem:[%s11089 + $0x44] sm:$0xf]
  %v11108 = vld [vmem:[%s11089 + $0x48] sm:$0xf]
  %v11109 = vld [vmem:[%s11089 + $0x4c] sm:$0xf]
  %v11110 = vld [vmem:[%s11089 + $0x50] sm:$0xf]
  %v11111 = vld [vmem:[%s11089 + $0x54] sm:$0xf]
  %v11112 = vld [vmem:[%s11089 + $0x58] sm:$0xf]
  %v11113 = vld [vmem:[%s11089 + $0x5c] sm:$0xf]
  %v11114 = vld [vmem:[%s11089 + $0x60] sm:$0xf]
  %v11115 = vld [vmem:[%s11089 + $0x64] sm:$0xf]
  %v11116 = vld [vmem:[%s11089 + $0x68] sm:$0xf]
  %v11117 = vld [vmem:[%s11089 + $0x6c] sm:$0xf]
  %v11118 = vld [vmem:[%s11089 + $0x70] sm:$0xf]
  %v11119 = vld [vmem:[%s11089 + $0x74] sm:$0xf]
  %v11120 = vld [vmem:[%s11089 + $0x78] sm:$0xf]
  %v11121 = vld [vmem:[%s11089 + $0x7c] sm:$0xf]
  %v11122 = vld [vmem:[%s11089 + $0x80] sm:$0xf]
  %v11123 = vld [vmem:[%s11089 + $0x84] sm:$0xf]
  %v11124 = vld [vmem:[%s11089 + $0x88] sm:$0xf]
  %v11125 = vld [vmem:[%s11089 + $0x8c] sm:$0xf]
  %v11126 = vld [vmem:[%s11089 + $0x90] sm:$0xf]
  %v11127 = vld [vmem:[%s11089 + $0x94] sm:$0xf]
  %v11128 = vld [vmem:[%s11089 + $0x98] sm:$0xf]
  %v11129 = vld [vmem:[%s11089 + $0x9c] sm:$0xf]
  %v11130 = vld [vmem:[%s11089 + $0xa0] sm:$0xf]
  %v11131 = vld [vmem:[%s11089 + $0xa4] sm:$0xf]
  %v11132 = vld [vmem:[%s11089 + $0xa8] sm:$0xf]
  %v11133 = vld [vmem:[%s11089 + $0xac] sm:$0xf]
  %v11134 = vld [vmem:[%s11089 + $0xb0] sm:$0xf]
  %v11135 = vld [vmem:[%s11089 + $0xb4] sm:$0xf]
  %v11136 = vld [vmem:[%s11089 + $0xb8] sm:$0xf]
  %v11137 = vld [vmem:[%s11089 + $0xbc] sm:$0xf]
  %s11138 = scalar_lea.vmem %s6, 1536
  %v11139 = vld [vmem:[%s11138] sm:$0xf]
  %v11140 = vld [vmem:[%s11138 + $0x4] sm:$0xf]
  %v11141 = vld [vmem:[%s11138 + $0x8] sm:$0xf]
  %v11142 = vld [vmem:[%s11138 + $0xc] sm:$0xf]
  %v11143 = vld [vmem:[%s11138 + $0x10] sm:$0xf]
  %v11144 = vld [vmem:[%s11138 + $0x14] sm:$0xf]
  %v11145 = vld [vmem:[%s11138 + $0x18] sm:$0xf]
  %v11146 = vld [vmem:[%s11138 + $0x1c] sm:$0xf]
  %v11147 = vld [vmem:[%s11138 + $0x20] sm:$0xf]
  %v11148 = vld [vmem:[%s11138 + $0x24] sm:$0xf]
  %v11149 = vld [vmem:[%s11138 + $0x28] sm:$0xf]
  %v11150 = vld [vmem:[%s11138 + $0x2c] sm:$0xf]
  %v11151 = vld [vmem:[%s11138 + $0x30] sm:$0xf]
  %v11152 = vld [vmem:[%s11138 + $0x34] sm:$0xf]
  %v11153 = vld [vmem:[%s11138 + $0x38] sm:$0xf]
  %v11154 = vld [vmem:[%s11138 + $0x3c] sm:$0xf]
  %v11155 = vld [vmem:[%s11138 + $0x40] sm:$0xf]
  %v11156 = vld [vmem:[%s11138 + $0x44] sm:$0xf]
  %v11157 = vld [vmem:[%s11138 + $0x48] sm:$0xf]
  %v11158 = vld [vmem:[%s11138 + $0x4c] sm:$0xf]
  %v11159 = vld [vmem:[%s11138 + $0x50] sm:$0xf]
  %v11160 = vld [vmem:[%s11138 + $0x54] sm:$0xf]
  %v11161 = vld [vmem:[%s11138 + $0x58] sm:$0xf]
  %v11162 = vld [vmem:[%s11138 + $0x5c] sm:$0xf]
  %v11163 = vld [vmem:[%s11138 + $0x60] sm:$0xf]
  %v11164 = vld [vmem:[%s11138 + $0x64] sm:$0xf]
  %v11165 = vld [vmem:[%s11138 + $0x68] sm:$0xf]
  %v11166 = vld [vmem:[%s11138 + $0x6c] sm:$0xf]
  %v11167 = vld [vmem:[%s11138 + $0x70] sm:$0xf]
  %v11168 = vld [vmem:[%s11138 + $0x74] sm:$0xf]
  %v11169 = vld [vmem:[%s11138 + $0x78] sm:$0xf]
  %v11170 = vld [vmem:[%s11138 + $0x7c] sm:$0xf]
  %v11171 = vld [vmem:[%s11138 + $0x80] sm:$0xf]
  %v11172 = vld [vmem:[%s11138 + $0x84] sm:$0xf]
  %v11173 = vld [vmem:[%s11138 + $0x88] sm:$0xf]
  %v11174 = vld [vmem:[%s11138 + $0x8c] sm:$0xf]
  %v11175 = vld [vmem:[%s11138 + $0x90] sm:$0xf]
  %v11176 = vld [vmem:[%s11138 + $0x94] sm:$0xf]
  %v11177 = vld [vmem:[%s11138 + $0x98] sm:$0xf]
  %v11178 = vld [vmem:[%s11138 + $0x9c] sm:$0xf]
  %v11179 = vld [vmem:[%s11138 + $0xa0] sm:$0xf]
  %v11180 = vld [vmem:[%s11138 + $0xa4] sm:$0xf]
  %v11181 = vld [vmem:[%s11138 + $0xa8] sm:$0xf]
  %v11182 = vld [vmem:[%s11138 + $0xac] sm:$0xf]
  %v11183 = vld [vmem:[%s11138 + $0xb0] sm:$0xf]
  %v11184 = vld [vmem:[%s11138 + $0xb4] sm:$0xf]
  %v11185 = vld [vmem:[%s11138 + $0xb8] sm:$0xf]
  %v11186 = vld [vmem:[%s11138 + $0xbc] sm:$0xf]
  %v11187 = vpack.c.bf16 %v11080, %v11077
  %v11188 = vpack.c.bf16 %v11081, %v11078
  %v11189 = vpack.c.bf16 %v11082, %v11079
  %v11190 = vpack.c.bf16 %v11086, %v11083
  %v11191 = vpack.c.bf16 %v11087, %v11084
  %v11192 = vpack.c.bf16 %v11088, %v11085
  %v11193 = vunpack.c.l.bf16 %v11187
  %v11194 = vunpack.c.l.bf16 %v11188
  %v11195 = vunpack.c.l.bf16 %v11189
  %v11196 = vunpack.c.h.bf16 %v11187
  %v11197 = vunpack.c.h.bf16 %v11188
  %v11198 = vunpack.c.h.bf16 %v11189
  %v11199 = vunpack.c.l.bf16 %v11190
  %v11200 = vunpack.c.l.bf16 %v11191
  %v11201 = vunpack.c.l.bf16 %v11192
  %v11202 = vunpack.c.h.bf16 %v11190
  %v11203 = vunpack.c.h.bf16 %v11191
  %v11204 = vunpack.c.h.bf16 %v11192
  %v11205 = vsub.f32 %v11077, %v11193
  %v11206 = vsub.f32 %v11078, %v11194
  %v11207 = vsub.f32 %v11079, %v11195
  %v11208 = vsub.f32 %v11080, %v11196
  %v11209 = vsub.f32 %v11081, %v11197
  %v11210 = vsub.f32 %v11082, %v11198
  %v11211 = vsub.f32 %v11083, %v11199
  %v11212 = vsub.f32 %v11084, %v11200
  %v11213 = vsub.f32 %v11085, %v11201
  %v11214 = vsub.f32 %v11086, %v11202
  %v11215 = vsub.f32 %v11087, %v11203
  %v11216 = vsub.f32 %v11088, %v11204
  %v11217 = vpack.c.bf16 %v11208, %v11205
  %v11218 = vpack.c.bf16 %v11209, %v11206
  %v11219 = vpack.c.bf16 %v11210, %v11207
  %v11220 = vpack.c.bf16 %v11214, %v11211
  %v11221 = vpack.c.bf16 %v11215, %v11212
  %v11222 = vpack.c.bf16 %v11216, %v11213
  %v11271 = vunpack.c.l.b16 %v11090
  %v11272 = vunpack.c.l.b16 %v11091
  %v11273 = vunpack.c.l.b16 %v11092
  %v11274 = vunpack.c.l.b16 %v11093
  %v11275 = vunpack.c.l.b16 %v11094
  %v11276 = vunpack.c.l.b16 %v11095
  %v11277 = vunpack.c.l.b16 %v11096
  %v11278 = vunpack.c.l.b16 %v11097
  %v11279 = vunpack.c.l.b16 %v11098
  %v11280 = vunpack.c.l.b16 %v11099
  %v11281 = vunpack.c.l.b16 %v11100
  %v11282 = vunpack.c.l.b16 %v11101
  %v11283 = vunpack.c.l.b16 %v11102
  %v11284 = vunpack.c.l.b16 %v11103
  %v11285 = vunpack.c.l.b16 %v11104
  %v11286 = vunpack.c.l.b16 %v11105
  %v11287 = vunpack.c.l.b16 %v11106
  %v11288 = vunpack.c.l.b16 %v11107
  %v11289 = vunpack.c.l.b16 %v11108
  %v11290 = vunpack.c.l.b16 %v11109
  %v11291 = vunpack.c.l.b16 %v11110
  %v11292 = vunpack.c.l.b16 %v11111
  %v11293 = vunpack.c.l.b16 %v11112
  %v11294 = vunpack.c.l.b16 %v11113
  %v11295 = vunpack.c.l.b16 %v11114
  %v11296 = vunpack.c.l.b16 %v11115
  %v11297 = vunpack.c.l.b16 %v11116
  %v11298 = vunpack.c.l.b16 %v11117
  %v11299 = vunpack.c.l.b16 %v11118
  %v11300 = vunpack.c.l.b16 %v11119
  %v11301 = vunpack.c.l.b16 %v11120
  %v11302 = vunpack.c.l.b16 %v11121
  %v11303 = vunpack.c.l.b16 %v11122
  %v11304 = vunpack.c.l.b16 %v11123
  %v11305 = vunpack.c.l.b16 %v11124
  %v11306 = vunpack.c.l.b16 %v11125
  %v11307 = vunpack.c.l.b16 %v11126
  %v11308 = vunpack.c.l.b16 %v11127
  %v11309 = vunpack.c.l.b16 %v11128
  %v11310 = vunpack.c.l.b16 %v11129
  %v11311 = vunpack.c.l.b16 %v11130
  %v11312 = vunpack.c.l.b16 %v11131
  %v11313 = vunpack.c.l.b16 %v11132
  %v11314 = vunpack.c.l.b16 %v11133
  %v11315 = vunpack.c.l.b16 %v11134
  %v11316 = vunpack.c.l.b16 %v11135
  %v11317 = vunpack.c.l.b16 %v11136
  %v11318 = vunpack.c.l.b16 %v11137
  %v11319 = vpack.c.b16 %v11272, %v11271
  %v11320 = vpack.c.b16 %v11274, %v11273
  %v11321 = vpack.c.b16 %v11276, %v11275
  %v11322 = vpack.c.b16 %v11278, %v11277
  %v11323 = vpack.c.b16 %v11280, %v11279
  %v11324 = vpack.c.b16 %v11282, %v11281
  %v11325 = vpack.c.b16 %v11284, %v11283
  %v11326 = vpack.c.b16 %v11286, %v11285
  %v11327 = vpack.c.b16 %v11288, %v11287
  %v11328 = vpack.c.b16 %v11290, %v11289
  %v11329 = vpack.c.b16 %v11292, %v11291
  %v11330 = vpack.c.b16 %v11294, %v11293
  %v11331 = vpack.c.b16 %v11296, %v11295
  %v11332 = vpack.c.b16 %v11298, %v11297
  %v11333 = vpack.c.b16 %v11300, %v11299
  %v11334 = vpack.c.b16 %v11302, %v11301
  %v11335 = vpack.c.b16 %v11304, %v11303
  %v11336 = vpack.c.b16 %v11306, %v11305
  %v11337 = vpack.c.b16 %v11308, %v11307
  %v11338 = vpack.c.b16 %v11310, %v11309
  %v11339 = vpack.c.b16 %v11312, %v11311
  %v11340 = vpack.c.b16 %v11314, %v11313
  %v11341 = vpack.c.b16 %v11316, %v11315
  %v11342 = vpack.c.b16 %v11318, %v11317
  %11367 = vmatprep.subr.bf16.mxu0 0
  %11368 = vmatpush1.bf16.msra.mxu0 %v11326
  %11369 = vmatprep.subr.bf16.mxu0 0
  %11370 = vmatpush1.bf16.msra.mxu0 %v11325
  %11371 = vmatprep.subr.bf16.mxu0 0
  %11372 = vmatpush1.bf16.msra.mxu0 %v11324
  %11373 = vmatprep.subr.bf16.mxu0 0
  %11374 = vmatpush1.bf16.msra.mxu0 %v11323
  %11375 = vmatprep.subr.bf16.mxu0 0
  %11376 = vmatpush1.bf16.msra.mxu0 %v11322
  %11377 = vmatprep.subr.bf16.mxu0 0
  %11378 = vmatpush1.bf16.msra.mxu0 %v11321
  %11379 = vmatprep.subr.bf16.mxu0 0
  %11380 = vmatpush1.bf16.msra.mxu0 %v11320
  %11381 = vmatprep.subr.bf16.mxu0 0
  %11382 = vmatpush1.bf16.msra.mxu0 %v11319
  %11383 = vmatprep.subr.bf16.mxu0 0
  %11384 = vmatpush2.bf16.msra.mxu0 %v11334
  %11385 = vmatprep.subr.bf16.mxu0 0
  %11386 = vmatpush2.bf16.msra.mxu0 %v11333
  %11387 = vmatprep.subr.bf16.mxu0 0
  %11388 = vmatpush2.bf16.msra.mxu0 %v11332
  %11389 = vmatprep.subr.bf16.mxu0 0
  %11390 = vmatpush2.bf16.msra.mxu0 %v11331
  %11391 = vmatprep.subr.bf16.mxu0 0
  %11392 = vmatpush2.bf16.msra.mxu0 %v11330
  %11393 = vmatprep.subr.bf16.mxu0 0
  %11394 = vmatpush2.bf16.msra.mxu0 %v11329
  %11395 = vmatprep.subr.bf16.mxu0 0
  %11396 = vmatpush2.bf16.msra.mxu0 %v11328
  %11397 = vmatprep.subr.bf16.mxu0 0
  %11398 = vmatpush2.bf16.msra.mxu0 %v11327
  %11399 = vmatprep.mubr.bf16.mxu0 %v11218
  %11400 = vmatmul.mubr.bf16.gmra.mxu0 %v11217
  %v11401 = vpop.f32.mrf.mxu0
  %v11402 = vadd.f32 0.0, %v11401
  %v11403 = vpop.f32.mrf.mxu0
  %v11404 = vpop.f32.mrf.mxu0
  %v11405 = vadd.f32 0.0, %v11404
  %v11406 = vpop.f32.mrf.mxu0
  %11407 = vmatprep.mubr.bf16.mxu0 %v11221
  %11408 = vmatmul.mubr.bf16.gmra.mxu0 %v11220
  %v11409 = vpop.f32.mrf.mxu0
  %v11410 = vadd.f32 0.0, %v11409
  %v11411 = vpop.f32.mrf.mxu0
  %v11412 = vpop.f32.mrf.mxu0
  %v11413 = vadd.f32 0.0, %v11412
  %v11414 = vpop.f32.mrf.mxu0
  %11415 = vdwg.mxu0
  %11416 = vmatprep.subr.bf16.mxu0 0
  %11417 = vmatpush1.bf16.msra.mxu0 %v11342
  %11418 = vmatprep.subr.bf16.mxu0 0
  %11419 = vmatpush1.bf16.msra.mxu0 %v11341
  %11420 = vmatprep.subr.bf16.mxu0 0
  %11421 = vmatpush1.bf16.msra.mxu0 %v11340
  %11422 = vmatprep.subr.bf16.mxu0 0
  %11423 = vmatpush1.bf16.msra.mxu0 %v11339
  %11424 = vmatprep.subr.bf16.mxu0 0
  %11425 = vmatpush1.bf16.msra.mxu0 %v11338
  %11426 = vmatprep.subr.bf16.mxu0 0
  %11427 = vmatpush1.bf16.msra.mxu0 %v11337
  %11428 = vmatprep.subr.bf16.mxu0 0
  %11429 = vmatpush1.bf16.msra.mxu0 %v11336
  %11430 = vmatprep.subr.bf16.mxu0 0
  %11431 = vmatpush1.bf16.msra.mxu0 %v11335
  %11432 = vmatprep.subr.bf16.mxu0 0
  %11433 = vmatpush2.bf16.msra.mxu0 0
  %11434 = vmatprep.subr.bf16.mxu0 0
  %11435 = vmatpush2.bf16.msra.mxu0 0
  %11436 = vmatprep.subr.bf16.mxu0 0
  %11437 = vmatpush2.bf16.msra.mxu0 0
  %11438 = vmatprep.subr.bf16.mxu0 0
  %11439 = vmatpush2.bf16.msra.mxu0 0
  %11440 = vmatprep.subr.bf16.mxu0 0
  %11441 = vmatpush2.bf16.msra.mxu0 0
  %11442 = vmatprep.subr.bf16.mxu0 0
  %11443 = vmatpush2.bf16.msra.mxu0 0
  %11444 = vmatprep.subr.bf16.mxu0 0
  %11445 = vmatpush2.bf16.msra.mxu0 0
  %11446 = vmatprep.subr.bf16.mxu0 0
  %11447 = vmatpush2.bf16.msra.mxu0 0
  %11448 = vmatprep.mubr.bf16.mxu0 0
  %11449 = vmatmul.mubr.bf16.gmra.mxu0 %v11219
  %v11450 = vpop.f32.mrf.mxu0
  %v11451 = vadd.f32 %v11402, %v11450
  %v11452 = vpop.f32.mrf.mxu0
  %v11453 = vpop.f32.mrf.mxu0
  %v11454 = vadd.f32 %v11405, %v11453
  %v11455 = vpop.f32.mrf.mxu0
  %11456 = vmatprep.mubr.bf16.mxu0 0
  %11457 = vmatmul.mubr.bf16.gmra.mxu0 %v11222
  %v11458 = vpop.f32.mrf.mxu0
  %v11459 = vadd.f32 %v11410, %v11458
  %v11460 = vpop.f32.mrf.mxu0
  %v11461 = vpop.f32.mrf.mxu0
  %v11462 = vadd.f32 %v11413, %v11461
  %v11463 = vpop.f32.mrf.mxu0
  %11464 = vdwg.mxu0
  %11465 = vmatprep.subr.bf16.mxu0 0
  %11466 = vmatpush1.bf16.msra.mxu0 %v11326
  %11467 = vmatprep.subr.bf16.mxu0 0
  %11468 = vmatpush1.bf16.msra.mxu0 %v11325
  %11469 = vmatprep.subr.bf16.mxu0 0
  %11470 = vmatpush1.bf16.msra.mxu0 %v11324
  %11471 = vmatprep.subr.bf16.mxu0 0
  %11472 = vmatpush1.bf16.msra.mxu0 %v11323
  %11473 = vmatprep.subr.bf16.mxu0 0
  %11474 = vmatpush1.bf16.msra.mxu0 %v11322
  %11475 = vmatprep.subr.bf16.mxu0 0
  %11476 = vmatpush1.bf16.msra.mxu0 %v11321
  %11477 = vmatprep.subr.bf16.mxu0 0
  %11478 = vmatpush1.bf16.msra.mxu0 %v11320
  %11479 = vmatprep.subr.bf16.mxu0 0
  %11480 = vmatpush1.bf16.msra.mxu0 %v11319
  %11481 = vmatprep.subr.bf16.mxu0 0
  %11482 = vmatpush2.bf16.msra.mxu0 %v11334
  %11483 = vmatprep.subr.bf16.mxu0 0
  %11484 = vmatpush2.bf16.msra.mxu0 %v11333
  %11485 = vmatprep.subr.bf16.mxu0 0
  %11486 = vmatpush2.bf16.msra.mxu0 %v11332
  %11487 = vmatprep.subr.bf16.mxu0 0
  %11488 = vmatpush2.bf16.msra.mxu0 %v11331
  %11489 = vmatprep.subr.bf16.mxu0 0
  %11490 = vmatpush2.bf16.msra.mxu0 %v11330
  %11491 = vmatprep.subr.bf16.mxu0 0
  %11492 = vmatpush2.bf16.msra.mxu0 %v11329
  %11493 = vmatprep.subr.bf16.mxu0 0
  %11494 = vmatpush2.bf16.msra.mxu0 %v11328
  %11495 = vmatprep.subr.bf16.mxu0 0
  %11496 = vmatpush2.bf16.msra.mxu0 %v11327
  %11497 = vmatprep.mubr.bf16.mxu0 %v11188
  %11498 = vmatmul.mubr.bf16.gmra.mxu0 %v11187
  %v11499 = vpop.f32.mrf.mxu0
  %v11500 = vadd.f32 %v11451, %v11499
  %v11501 = vpop.f32.mrf.mxu0
  %v11502 = vpop.f32.mrf.mxu0
  %v11503 = vadd.f32 %v11454, %v11502
  %v11504 = vpop.f32.mrf.mxu0
  %11505 = vmatprep.mubr.bf16.mxu0 %v11191
  %11506 = vmatmul.mubr.bf16.gmra.mxu0 %v11190
  %v11507 = vpop.f32.mrf.mxu0
  %v11508 = vadd.f32 %v11459, %v11507
  %v11509 = vpop.f32.mrf.mxu0
  %v11510 = vpop.f32.mrf.mxu0
  %v11511 = vadd.f32 %v11462, %v11510
  %v11512 = vpop.f32.mrf.mxu0
  %11513 = vdwg.mxu0
  %11514 = vmatprep.subr.bf16.mxu0 0
  %11515 = vmatpush1.bf16.msra.mxu0 %v11342
  %11516 = vmatprep.subr.bf16.mxu0 0
  %11517 = vmatpush1.bf16.msra.mxu0 %v11341
  %11518 = vmatprep.subr.bf16.mxu0 0
  %11519 = vmatpush1.bf16.msra.mxu0 %v11340
  %11520 = vmatprep.subr.bf16.mxu0 0
  %11521 = vmatpush1.bf16.msra.mxu0 %v11339
  %11522 = vmatprep.subr.bf16.mxu0 0
  %11523 = vmatpush1.bf16.msra.mxu0 %v11338
  %11524 = vmatprep.subr.bf16.mxu0 0
  %11525 = vmatpush1.bf16.msra.mxu0 %v11337
  %11526 = vmatprep.subr.bf16.mxu0 0
  %11527 = vmatpush1.bf16.msra.mxu0 %v11336
  %11528 = vmatprep.subr.bf16.mxu0 0
  %11529 = vmatpush1.bf16.msra.mxu0 %v11335
  %11530 = vmatprep.subr.bf16.mxu0 0
  %11531 = vmatpush2.bf16.msra.mxu0 0
  %11532 = vmatprep.subr.bf16.mxu0 0
  %11533 = vmatpush2.bf16.msra.mxu0 0
  %11534 = vmatprep.subr.bf16.mxu0 0
  %11535 = vmatpush2.bf16.msra.mxu0 0
  %11536 = vmatprep.subr.bf16.mxu0 0
  %11537 = vmatpush2.bf16.msra.mxu0 0
  %11538 = vmatprep.subr.bf16.mxu0 0
  %11539 = vmatpush2.bf16.msra.mxu0 0
  %11540 = vmatprep.subr.bf16.mxu0 0
  %11541 = vmatpush2.bf16.msra.mxu0 0
  %11542 = vmatprep.subr.bf16.mxu0 0
  %11543 = vmatpush2.bf16.msra.mxu0 0
  %11544 = vmatprep.subr.bf16.mxu0 0
  %11545 = vmatpush2.bf16.msra.mxu0 0
  %11546 = vmatprep.mubr.bf16.mxu0 0
  %11547 = vmatmul.mubr.bf16.gmra.mxu0 %v11189
  %v11548 = vpop.f32.mrf.mxu0
  %v11549 = vadd.f32 %v11500, %v11548
  %v11550 = vpop.f32.mrf.mxu0
  %v11551 = vpop.f32.mrf.mxu0
  %v11552 = vadd.f32 %v11503, %v11551
  %v11553 = vpop.f32.mrf.mxu0
  %11554 = vmatprep.mubr.bf16.mxu0 0
  %11555 = vmatmul.mubr.bf16.gmra.mxu0 %v11192
  %v11556 = vpop.f32.mrf.mxu0
  %v11557 = vadd.f32 %v11508, %v11556
  %v11558 = vpop.f32.mrf.mxu0
  %v11559 = vpop.f32.mrf.mxu0
  %v11560 = vadd.f32 %v11511, %v11559
  %v11561 = vpop.f32.mrf.mxu0
  %11562 = vdwg.mxu0
  %v11611 = vunpack.c.l.b16 %v11139
  %v11612 = vunpack.c.l.b16 %v11140
  %v11613 = vunpack.c.l.b16 %v11141
  %v11614 = vunpack.c.l.b16 %v11142
  %v11615 = vunpack.c.l.b16 %v11143
  %v11616 = vunpack.c.l.b16 %v11144
  %v11617 = vunpack.c.l.b16 %v11145
  %v11618 = vunpack.c.l.b16 %v11146
  %v11619 = vunpack.c.l.b16 %v11147
  %v11620 = vunpack.c.l.b16 %v11148
  %v11621 = vunpack.c.l.b16 %v11149
  %v11622 = vunpack.c.l.b16 %v11150
  %v11623 = vunpack.c.l.b16 %v11151
  %v11624 = vunpack.c.l.b16 %v11152
  %v11625 = vunpack.c.l.b16 %v11153
  %v11626 = vunpack.c.l.b16 %v11154
  %v11627 = vunpack.c.l.b16 %v11155
  %v11628 = vunpack.c.l.b16 %v11156
  %v11629 = vunpack.c.l.b16 %v11157
  %v11630 = vunpack.c.l.b16 %v11158
  %v11631 = vunpack.c.l.b16 %v11159
  %v11632 = vunpack.c.l.b16 %v11160
  %v11633 = vunpack.c.l.b16 %v11161
  %v11634 = vunpack.c.l.b16 %v11162
  %v11635 = vunpack.c.l.b16 %v11163
  %v11636 = vunpack.c.l.b16 %v11164
  %v11637 = vunpack.c.l.b16 %v11165
  %v11638 = vunpack.c.l.b16 %v11166
  %v11639 = vunpack.c.l.b16 %v11167
  %v11640 = vunpack.c.l.b16 %v11168
  %v11641 = vunpack.c.l.b16 %v11169
  %v11642 = vunpack.c.l.b16 %v11170
  %v11643 = vunpack.c.l.b16 %v11171
  %v11644 = vunpack.c.l.b16 %v11172
  %v11645 = vunpack.c.l.b16 %v11173
  %v11646 = vunpack.c.l.b16 %v11174
  %v11647 = vunpack.c.l.b16 %v11175
  %v11648 = vunpack.c.l.b16 %v11176
  %v11649 = vunpack.c.l.b16 %v11177
  %v11650 = vunpack.c.l.b16 %v11178
  %v11651 = vunpack.c.l.b16 %v11179
  %v11652 = vunpack.c.l.b16 %v11180
  %v11653 = vunpack.c.l.b16 %v11181
  %v11654 = vunpack.c.l.b16 %v11182
  %v11655 = vunpack.c.l.b16 %v11183
  %v11656 = vunpack.c.l.b16 %v11184
  %v11657 = vunpack.c.l.b16 %v11185
  %v11658 = vunpack.c.l.b16 %v11186
  %v11659 = vpack.c.b16 %v11612, %v11611
  %v11660 = vpack.c.b16 %v11614, %v11613
  %v11661 = vpack.c.b16 %v11616, %v11615
  %v11662 = vpack.c.b16 %v11618, %v11617
  %v11663 = vpack.c.b16 %v11620, %v11619
  %v11664 = vpack.c.b16 %v11622, %v11621
  %v11665 = vpack.c.b16 %v11624, %v11623
  %v11666 = vpack.c.b16 %v11626, %v11625
  %v11667 = vpack.c.b16 %v11628, %v11627
  %v11668 = vpack.c.b16 %v11630, %v11629
  %v11669 = vpack.c.b16 %v11632, %v11631
  %v11670 = vpack.c.b16 %v11634, %v11633
  %v11671 = vpack.c.b16 %v11636, %v11635
  %v11672 = vpack.c.b16 %v11638, %v11637
  %v11673 = vpack.c.b16 %v11640, %v11639
  %v11674 = vpack.c.b16 %v11642, %v11641
  %v11675 = vpack.c.b16 %v11644, %v11643
  %v11676 = vpack.c.b16 %v11646, %v11645
  %v11677 = vpack.c.b16 %v11648, %v11647
  %v11678 = vpack.c.b16 %v11650, %v11649
  %v11679 = vpack.c.b16 %v11652, %v11651
  %v11680 = vpack.c.b16 %v11654, %v11653
  %v11681 = vpack.c.b16 %v11656, %v11655
  %v11682 = vpack.c.b16 %v11658, %v11657
  %11707 = vmatprep.subr.bf16.mxu0 0
  %11708 = vmatpush1.bf16.msra.mxu0 %v11666
  %11709 = vmatprep.subr.bf16.mxu0 0
  %11710 = vmatpush1.bf16.msra.mxu0 %v11665
  %11711 = vmatprep.subr.bf16.mxu0 0
  %11712 = vmatpush1.bf16.msra.mxu0 %v11664
  %11713 = vmatprep.subr.bf16.mxu0 0
  %11714 = vmatpush1.bf16.msra.mxu0 %v11663
  %11715 = vmatprep.subr.bf16.mxu0 0
  %11716 = vmatpush1.bf16.msra.mxu0 %v11662
  %11717 = vmatprep.subr.bf16.mxu0 0
  %11718 = vmatpush1.bf16.msra.mxu0 %v11661
  %11719 = vmatprep.subr.bf16.mxu0 0
  %11720 = vmatpush1.bf16.msra.mxu0 %v11660
  %11721 = vmatprep.subr.bf16.mxu0 0
  %11722 = vmatpush1.bf16.msra.mxu0 %v11659
  %11723 = vmatprep.subr.bf16.mxu0 0
  %11724 = vmatpush2.bf16.msra.mxu0 %v11674
  %11725 = vmatprep.subr.bf16.mxu0 0
  %11726 = vmatpush2.bf16.msra.mxu0 %v11673
  %11727 = vmatprep.subr.bf16.mxu0 0
  %11728 = vmatpush2.bf16.msra.mxu0 %v11672
  %11729 = vmatprep.subr.bf16.mxu0 0
  %11730 = vmatpush2.bf16.msra.mxu0 %v11671
  %11731 = vmatprep.subr.bf16.mxu0 0
  %11732 = vmatpush2.bf16.msra.mxu0 %v11670
  %11733 = vmatprep.subr.bf16.mxu0 0
  %11734 = vmatpush2.bf16.msra.mxu0 %v11669
  %11735 = vmatprep.subr.bf16.mxu0 0
  %11736 = vmatpush2.bf16.msra.mxu0 %v11668
  %11737 = vmatprep.subr.bf16.mxu0 0
  %11738 = vmatpush2.bf16.msra.mxu0 %v11667
  %11739 = vmatprep.mubr.bf16.mxu0 %v11188
  %11740 = vmatmul.mubr.bf16.gmra.mxu0 %v11187
  %v11741 = vpop.f32.mrf.mxu0
  %v11742 = vadd.f32 0.0, %v11741
  %v11743 = vpop.f32.mrf.mxu0
  %v11744 = vpop.f32.mrf.mxu0
  %v11745 = vadd.f32 0.0, %v11744
  %v11746 = vpop.f32.mrf.mxu0
  %11747 = vmatprep.mubr.bf16.mxu0 %v11191
  %11748 = vmatmul.mubr.bf16.gmra.mxu0 %v11190
  %v11749 = vpop.f32.mrf.mxu0
  %v11750 = vadd.f32 0.0, %v11749
  %v11751 = vpop.f32.mrf.mxu0
  %v11752 = vpop.f32.mrf.mxu0
  %v11753 = vadd.f32 0.0, %v11752
  %v11754 = vpop.f32.mrf.mxu0
  %11755 = vdwg.mxu0
  %11756 = vmatprep.subr.bf16.mxu0 0
  %11757 = vmatpush1.bf16.msra.mxu0 %v11682
  %11758 = vmatprep.subr.bf16.mxu0 0
  %11759 = vmatpush1.bf16.msra.mxu0 %v11681
  %11760 = vmatprep.subr.bf16.mxu0 0
  %11761 = vmatpush1.bf16.msra.mxu0 %v11680
  %11762 = vmatprep.subr.bf16.mxu0 0
  %11763 = vmatpush1.bf16.msra.mxu0 %v11679
  %11764 = vmatprep.subr.bf16.mxu0 0
  %11765 = vmatpush1.bf16.msra.mxu0 %v11678
  %11766 = vmatprep.subr.bf16.mxu0 0
  %11767 = vmatpush1.bf16.msra.mxu0 %v11677
  %11768 = vmatprep.subr.bf16.mxu0 0
  %11769 = vmatpush1.bf16.msra.mxu0 %v11676
  %11770 = vmatprep.subr.bf16.mxu0 0
  %11771 = vmatpush1.bf16.msra.mxu0 %v11675
  %11772 = vmatprep.subr.bf16.mxu0 0
  %11773 = vmatpush2.bf16.msra.mxu0 0
  %11774 = vmatprep.subr.bf16.mxu0 0
  %11775 = vmatpush2.bf16.msra.mxu0 0
  %11776 = vmatprep.subr.bf16.mxu0 0
  %11777 = vmatpush2.bf16.msra.mxu0 0
  %11778 = vmatprep.subr.bf16.mxu0 0
  %11779 = vmatpush2.bf16.msra.mxu0 0
  %11780 = vmatprep.subr.bf16.mxu0 0
  %11781 = vmatpush2.bf16.msra.mxu0 0
  %11782 = vmatprep.subr.bf16.mxu0 0
  %11783 = vmatpush2.bf16.msra.mxu0 0
  %11784 = vmatprep.subr.bf16.mxu0 0
  %11785 = vmatpush2.bf16.msra.mxu0 0
  %11786 = vmatprep.subr.bf16.mxu0 0
  %11787 = vmatpush2.bf16.msra.mxu0 0
  %11788 = vmatprep.mubr.bf16.mxu0 0
  %11789 = vmatmul.mubr.bf16.gmra.mxu0 %v11189
  %v11790 = vpop.f32.mrf.mxu0
  %v11791 = vadd.f32 %v11742, %v11790
  %v11792 = vpop.f32.mrf.mxu0
  %v11793 = vpop.f32.mrf.mxu0
  %v11794 = vadd.f32 %v11745, %v11793
  %v11795 = vpop.f32.mrf.mxu0
  %11796 = vmatprep.mubr.bf16.mxu0 0
  %11797 = vmatmul.mubr.bf16.gmra.mxu0 %v11192
  %v11798 = vpop.f32.mrf.mxu0
  %v11799 = vadd.f32 %v11750, %v11798
  %v11800 = vpop.f32.mrf.mxu0
  %v11801 = vpop.f32.mrf.mxu0
  %v11802 = vadd.f32 %v11753, %v11801
  %v11803 = vpop.f32.mrf.mxu0
  %11804 = vdwg.mxu0
  %v11805 = vadd.f32 %v11549, %v11791
  %v11806 = vadd.f32 %v11552, %v11794
  %v11807 = vadd.f32 %v11557, %v11799
  %v11808 = vadd.f32 %v11560, %v11802
  %v11809 = vadd.f32 %v11073, %v11805
  %v11810 = vadd.f32 %v11074, %v11806
  %v11811 = vadd.f32 %v11075, %v11807
  %v11812 = vadd.f32 %v11076, %v11808
  %v11813 = vld [vmem:[%s7] sm:$0x1]
  %v11815 = vlaneseq
  %v11816 = vshrl.u32 %v11815, 7
  %v11817 = vsub.s32 0, %v11816
  %v11818 = vrot.slane %v11813, %v11817
  %v11820 = vadd.f32 %v11809, %v11818
  %v11821 = vadd.f32 %v11810, %v11818
  %v11822 = vadd.f32 %v11811, %v11818
  %v11823 = vadd.f32 %v11812, %v11818
  %v11824 = vmax.f32 %v11820, 0.0
  %v11825 = vmax.f32 %v11821, 0.0
  %v11826 = vmax.f32 %v11822, 0.0
  %v11827 = vmax.f32 %v11823, 0.0
  %11832 = vrot.lane.b32.xlu0 %v11824, 64
  %v11833 = vpop.permute.xlu0 %11832
  %11834 = vrot.lane.b32.xlu0 %v11825, 64
  %v11835 = vpop.permute.xlu0 %11834
  %11836 = vrot.lane.b32.xlu0 %v11826, 64
  %v11837 = vpop.permute.xlu0 %11836
  %11838 = vrot.lane.b32.xlu0 %v11827, 64
  %v11839 = vpop.permute.xlu0 %11838
  %v11844 = vmax.f32 %v11824, %v11833
  %v11845 = vmax.f32 %v11825, %v11835
  %v11846 = vmax.f32 %v11826, %v11837
  %v11847 = vmax.f32 %v11827, %v11839
  %v11848 = vmax.f32 %v11844, %v11845
  %v11849 = vmax.f32 %v11846, %v11847
  %11851 = vrot.lane.b32.xlu0 %v11849, 64
  %v11852 = vpop.permute.xlu0 %11851
  %v11854 = vsel %vm248, %v11848, %v11852
  %v11855 = vld [vmem:[%s8] sm:$0xff]
  %v11856 = vld [vmem:[%s8 + $0x8] sm:$0xff]
  %v11857 = vld [vmem:[%s8 + $0x10] sm:$0xff]
  %v11858 = vld [vmem:[%s8 + $0x18] sm:$0xff]
  %v11859 = vld [vmem:[%s8 + $0x20] sm:$0xff]
  %v11860 = vld [vmem:[%s8 + $0x28] sm:$0xff]
  %v11861 = vld [vmem:[%s8 + $0x30] sm:$0xff]
  %v11862 = vld [vmem:[%s8 + $0x38] sm:$0xff]
  %v11863 = vld [vmem:[%s8 + $0x40] sm:$0xff]
  %v11864 = vld [vmem:[%s8 + $0x48] sm:$0xff]
  %v11865 = vld [vmem:[%s8 + $0x50] sm:$0xff]
  %v11866 = vld [vmem:[%s8 + $0x58] sm:$0xff]
  %v11867 = vld [vmem:[%s8 + $0x60] sm:$0xff]
  %v11868 = vld [vmem:[%s8 + $0x68] sm:$0xff]
  %v11869 = vld [vmem:[%s8 + $0x70] sm:$0xff]
  %v11870 = vld [vmem:[%s8 + $0x78] sm:$0xff]
  %v11871 = vld [vmem:[%s9] sm:$0x1]
  %v11873 = vlaneseq
  %v11874 = vshrl.u32 %v11873, 7
  %v11875 = vsub.s32 0, %v11874
  %v11876 = vrot.slane %v11871, %v11875
  %11878 = vmatprep.subr.mxu0 0.0
  %v11879 = vand.u32 %v11870, 4294901760
  %11880 = vmatpush1.msra.mxu0 %v11879
  %11881 = vmatprep.subr.mxu0 0.0
  %v11882 = vand.u32 %v11869, 4294901760
  %11883 = vmatpush1.msra.mxu0 %v11882
  %11884 = vmatprep.subr.mxu0 0.0
  %v11885 = vand.u32 %v11868, 4294901760
  %11886 = vmatpush1.msra.mxu0 %v11885
  %11887 = vmatprep.subr.mxu0 0.0
  %v11888 = vand.u32 %v11867, 4294901760
  %11889 = vmatpush1.msra.mxu0 %v11888
  %11890 = vmatprep.subr.mxu0 0.0
  %v11891 = vand.u32 %v11866, 4294901760
  %11892 = vmatpush1.msra.mxu0 %v11891
  %11893 = vmatprep.subr.mxu0 0.0
  %v11894 = vand.u32 %v11865, 4294901760
  %11895 = vmatpush1.msra.mxu0 %v11894
  %11896 = vmatprep.subr.mxu0 0.0
  %v11897 = vand.u32 %v11864, 4294901760
  %11898 = vmatpush1.msra.mxu0 %v11897
  %11899 = vmatprep.subr.mxu0 0.0
  %v11900 = vand.u32 %v11863, 4294901760
  %11901 = vmatpush1.msra.mxu0 %v11900
  %11902 = vmatprep.subr.mxu0 0.0
  %v11903 = vand.u32 %v11862, 4294901760
  %11904 = vmatpush1.msra.mxu0 %v11903
  %11905 = vmatprep.subr.mxu0 0.0
  %v11906 = vand.u32 %v11861, 4294901760
  %11907 = vmatpush1.msra.mxu0 %v11906
  %11908 = vmatprep.subr.mxu0 0.0
  %v11909 = vand.u32 %v11860, 4294901760
  %11910 = vmatpush1.msra.mxu0 %v11909
  %11911 = vmatprep.subr.mxu0 0.0
  %v11912 = vand.u32 %v11859, 4294901760
  %11913 = vmatpush1.msra.mxu0 %v11912
  %11914 = vmatprep.subr.mxu0 0.0
  %v11915 = vand.u32 %v11858, 4294901760
  %11916 = vmatpush1.msra.mxu0 %v11915
  %11917 = vmatprep.subr.mxu0 0.0
  %v11918 = vand.u32 %v11857, 4294901760
  %11919 = vmatpush1.msra.mxu0 %v11918
  %11920 = vmatprep.subr.mxu0 0.0
  %v11921 = vand.u32 %v11856, 4294901760
  %11922 = vmatpush1.msra.mxu0 %v11921
  %11923 = vmatprep.subr.mxu0 0.0
  %v11924 = vand.u32 %v11855, 4294901760
  %11925 = vmatpush1.msra.mxu0 %v11924
  %11926 = vmatprep.subr.mxu0 0.0
  %11927 = vmatpush2.msra.mxu0 0.0
  %11928 = vmatprep.subr.mxu0 0.0
  %11929 = vmatpush2.msra.mxu0 0.0
  %11930 = vmatprep.subr.mxu0 0.0
  %11931 = vmatpush2.msra.mxu0 0.0
  %11932 = vmatprep.subr.mxu0 0.0
  %11933 = vmatpush2.msra.mxu0 0.0
  %11934 = vmatprep.subr.mxu0 0.0
  %11935 = vmatpush2.msra.mxu0 0.0
  %11936 = vmatprep.subr.mxu0 0.0
  %11937 = vmatpush2.msra.mxu0 0.0
  %11938 = vmatprep.subr.mxu0 0.0
  %11939 = vmatpush2.msra.mxu0 0.0
  %11940 = vmatprep.subr.mxu0 0.0
  %11941 = vmatpush2.msra.mxu0 0.0
  %11942 = vmatprep.subr.mxu0 0.0
  %11943 = vmatpush2.msra.mxu0 0.0
  %11944 = vmatprep.subr.mxu0 0.0
  %11945 = vmatpush2.msra.mxu0 0.0
  %11946 = vmatprep.subr.mxu0 0.0
  %11947 = vmatpush2.msra.mxu0 0.0
  %11948 = vmatprep.subr.mxu0 0.0
  %11949 = vmatpush2.msra.mxu0 0.0
  %11950 = vmatprep.subr.mxu0 0.0
  %11951 = vmatpush2.msra.mxu0 0.0
  %11952 = vmatprep.subr.mxu0 0.0
  %11953 = vmatpush2.msra.mxu0 0.0
  %11954 = vmatprep.subr.mxu0 0.0
  %11955 = vmatpush2.msra.mxu0 0.0
  %11956 = vmatprep.subr.mxu0 0.0
  %11957 = vmatpush2.msra.mxu0 0.0
  %11958 = vmatprep.mubr.f32.mxu0 0.0
  %v11959 = vand.u32 %v11854, 4294901760
  %v11960 = vsub.f32 %v11854, %v11959
  %v11961 = vand.u32 %v11960, 4294901760
  %v11962 = vsub.f32 %v11960, %v11961
  %v11963 = vand.u32 %v11962, 4294901760
  %11964 = vmatmul.mubr.f32.gmra.mxu0 %v11963
  %v11965 = vpop.f32.mrf.mxu0
  %v11966 = vadd.f32 %v11876, %v11965
  %v11967 = vpop.f32.mrf.mxu0
  %11968 = vdwg.mxu0
  %11969 = vmatprep.subr.mxu0 0.0
  %v11970 = vand.u32 %v11870, 4294901760
  %v11971 = vsub.f32 %v11870, %v11970
  %v11972 = vand.u32 %v11971, 4294901760
  %v11973 = vsub.f32 %v11971, %v11972
  %v11974 = vand.u32 %v11973, 4294901760
  %11975 = vmatpush1.msra.mxu0 %v11974
  %11976 = vmatprep.subr.mxu0 0.0
  %v11977 = vand.u32 %v11869, 4294901760
  %v11978 = vsub.f32 %v11869, %v11977
  %v11979 = vand.u32 %v11978, 4294901760
  %v11980 = vsub.f32 %v11978, %v11979
  %v11981 = vand.u32 %v11980, 4294901760
  %11982 = vmatpush1.msra.mxu0 %v11981
  %11983 = vmatprep.subr.mxu0 0.0
  %v11984 = vand.u32 %v11868, 4294901760
  %v11985 = vsub.f32 %v11868, %v11984
  %v11986 = vand.u32 %v11985, 4294901760
  %v11987 = vsub.f32 %v11985, %v11986
  %v11988 = vand.u32 %v11987, 4294901760
  %11989 = vmatpush1.msra.mxu0 %v11988
  %11990 = vmatprep.subr.mxu0 0.0
  %v11991 = vand.u32 %v11867, 4294901760
  %v11992 = vsub.f32 %v11867, %v11991
  %v11993 = vand.u32 %v11992, 4294901760
  %v11994 = vsub.f32 %v11992, %v11993
  %v11995 = vand.u32 %v11994, 4294901760
  %11996 = vmatpush1.msra.mxu0 %v11995
  %11997 = vmatprep.subr.mxu0 0.0
  %v11998 = vand.u32 %v11866, 4294901760
  %v11999 = vsub.f32 %v11866, %v11998
  %v12000 = vand.u32 %v11999, 4294901760
  %v12001 = vsub.f32 %v11999, %v12000
  %v12002 = vand.u32 %v12001, 4294901760
  %12003 = vmatpush1.msra.mxu0 %v12002
  %12004 = vmatprep.subr.mxu0 0.0
  %v12005 = vand.u32 %v11865, 4294901760
  %v12006 = vsub.f32 %v11865, %v12005
  %v12007 = vand.u32 %v12006, 4294901760
  %v12008 = vsub.f32 %v12006, %v12007
  %v12009 = vand.u32 %v12008, 4294901760
  %12010 = vmatpush1.msra.mxu0 %v12009
  %12011 = vmatprep.subr.mxu0 0.0
  %v12012 = vand.u32 %v11864, 4294901760
  %v12013 = vsub.f32 %v11864, %v12012
  %v12014 = vand.u32 %v12013, 4294901760
  %v12015 = vsub.f32 %v12013, %v12014
  %v12016 = vand.u32 %v12015, 4294901760
  %12017 = vmatpush1.msra.mxu0 %v12016
  %12018 = vmatprep.subr.mxu0 0.0
  %v12019 = vand.u32 %v11863, 4294901760
  %v12020 = vsub.f32 %v11863, %v12019
  %v12021 = vand.u32 %v12020, 4294901760
  %v12022 = vsub.f32 %v12020, %v12021
  %v12023 = vand.u32 %v12022, 4294901760
  %12024 = vmatpush1.msra.mxu0 %v12023
  %12025 = vmatprep.subr.mxu0 0.0
  %v12026 = vand.u32 %v11862, 4294901760
  %v12027 = vsub.f32 %v11862, %v12026
  %v12028 = vand.u32 %v12027, 4294901760
  %v12029 = vsub.f32 %v12027, %v12028
  %v12030 = vand.u32 %v12029, 4294901760
  %12031 = vmatpush1.msra.mxu0 %v12030
  %12032 = vmatprep.subr.mxu0 0.0
  %v12033 = vand.u32 %v11861, 4294901760
  %v12034 = vsub.f32 %v11861, %v12033
  %v12035 = vand.u32 %v12034, 4294901760
  %v12036 = vsub.f32 %v12034, %v12035
  %v12037 = vand.u32 %v12036, 4294901760
  %12038 = vmatpush1.msra.mxu0 %v12037
  %12039 = vmatprep.subr.mxu0 0.0
  %v12040 = vand.u32 %v11860, 4294901760
  %v12041 = vsub.f32 %v11860, %v12040
  %v12042 = vand.u32 %v12041, 4294901760
  %v12043 = vsub.f32 %v12041, %v12042
  %v12044 = vand.u32 %v12043, 4294901760
  %12045 = vmatpush1.msra.mxu0 %v12044
  %12046 = vmatprep.subr.mxu0 0.0
  %v12047 = vand.u32 %v11859, 4294901760
  %v12048 = vsub.f32 %v11859, %v12047
  %v12049 = vand.u32 %v12048, 4294901760
  %v12050 = vsub.f32 %v12048, %v12049
  %v12051 = vand.u32 %v12050, 4294901760
  %12052 = vmatpush1.msra.mxu0 %v12051
  %12053 = vmatprep.subr.mxu0 0.0
  %v12054 = vand.u32 %v11858, 4294901760
  %v12055 = vsub.f32 %v11858, %v12054
  %v12056 = vand.u32 %v12055, 4294901760
  %v12057 = vsub.f32 %v12055, %v12056
  %v12058 = vand.u32 %v12057, 4294901760
  %12059 = vmatpush1.msra.mxu0 %v12058
  %12060 = vmatprep.subr.mxu0 0.0
  %v12061 = vand.u32 %v11857, 4294901760
  %v12062 = vsub.f32 %v11857, %v12061
  %v12063 = vand.u32 %v12062, 4294901760
  %v12064 = vsub.f32 %v12062, %v12063
  %v12065 = vand.u32 %v12064, 4294901760
  %12066 = vmatpush1.msra.mxu0 %v12065
  %12067 = vmatprep.subr.mxu0 0.0
  %v12068 = vand.u32 %v11856, 4294901760
  %v12069 = vsub.f32 %v11856, %v12068
  %v12070 = vand.u32 %v12069, 4294901760
  %v12071 = vsub.f32 %v12069, %v12070
  %v12072 = vand.u32 %v12071, 4294901760
  %12073 = vmatpush1.msra.mxu0 %v12072
  %12074 = vmatprep.subr.mxu0 0.0
  %v12075 = vand.u32 %v11855, 4294901760
  %v12076 = vsub.f32 %v11855, %v12075
  %v12077 = vand.u32 %v12076, 4294901760
  %v12078 = vsub.f32 %v12076, %v12077
  %v12079 = vand.u32 %v12078, 4294901760
  %12080 = vmatpush1.msra.mxu0 %v12079
  %12081 = vmatprep.subr.mxu0 0.0
  %12082 = vmatpush2.msra.mxu0 0.0
  %12083 = vmatprep.subr.mxu0 0.0
  %12084 = vmatpush2.msra.mxu0 0.0
  %12085 = vmatprep.subr.mxu0 0.0
  %12086 = vmatpush2.msra.mxu0 0.0
  %12087 = vmatprep.subr.mxu0 0.0
  %12088 = vmatpush2.msra.mxu0 0.0
  %12089 = vmatprep.subr.mxu0 0.0
  %12090 = vmatpush2.msra.mxu0 0.0
  %12091 = vmatprep.subr.mxu0 0.0
  %12092 = vmatpush2.msra.mxu0 0.0
  %12093 = vmatprep.subr.mxu0 0.0
  %12094 = vmatpush2.msra.mxu0 0.0
  %12095 = vmatprep.subr.mxu0 0.0
  %12096 = vmatpush2.msra.mxu0 0.0
  %12097 = vmatprep.subr.mxu0 0.0
  %12098 = vmatpush2.msra.mxu0 0.0
  %12099 = vmatprep.subr.mxu0 0.0
  %12100 = vmatpush2.msra.mxu0 0.0
  %12101 = vmatprep.subr.mxu0 0.0
  %12102 = vmatpush2.msra.mxu0 0.0
  %12103 = vmatprep.subr.mxu0 0.0
  %12104 = vmatpush2.msra.mxu0 0.0
  %12105 = vmatprep.subr.mxu0 0.0
  %12106 = vmatpush2.msra.mxu0 0.0
  %12107 = vmatprep.subr.mxu0 0.0
  %12108 = vmatpush2.msra.mxu0 0.0
  %12109 = vmatprep.subr.mxu0 0.0
  %12110 = vmatpush2.msra.mxu0 0.0
  %12111 = vmatprep.subr.mxu0 0.0
  %12112 = vmatpush2.msra.mxu0 0.0
  %12113 = vmatprep.mubr.f32.mxu0 0.0
  %v12114 = vand.u32 %v11854, 4294901760
  %12115 = vmatmul.mubr.f32.gmra.mxu0 %v12114
  %v12116 = vpop.f32.mrf.mxu0
  %v12117 = vadd.f32 %v11966, %v12116
  %v12118 = vpop.f32.mrf.mxu0
  %12119 = vdwg.mxu0
  %12120 = vmatprep.subr.mxu0 0.0
  %v12121 = vand.u32 %v11870, 4294901760
  %v12122 = vsub.f32 %v11870, %v12121
  %12123 = vmatpush1.msra.mxu0 %v12122
  %12124 = vmatprep.subr.mxu0 0.0
  %v12125 = vand.u32 %v11869, 4294901760
  %v12126 = vsub.f32 %v11869, %v12125
  %12127 = vmatpush1.msra.mxu0 %v12126
  %12128 = vmatprep.subr.mxu0 0.0
  %v12129 = vand.u32 %v11868, 4294901760
  %v12130 = vsub.f32 %v11868, %v12129
  %12131 = vmatpush1.msra.mxu0 %v12130
  %12132 = vmatprep.subr.mxu0 0.0
  %v12133 = vand.u32 %v11867, 4294901760
  %v12134 = vsub.f32 %v11867, %v12133
  %12135 = vmatpush1.msra.mxu0 %v12134
  %12136 = vmatprep.subr.mxu0 0.0
  %v12137 = vand.u32 %v11866, 4294901760
  %v12138 = vsub.f32 %v11866, %v12137
  %12139 = vmatpush1.msra.mxu0 %v12138
  %12140 = vmatprep.subr.mxu0 0.0
  %v12141 = vand.u32 %v11865, 4294901760
  %v12142 = vsub.f32 %v11865, %v12141
  %12143 = vmatpush1.msra.mxu0 %v12142
  %12144 = vmatprep.subr.mxu0 0.0
  %v12145 = vand.u32 %v11864, 4294901760
  %v12146 = vsub.f32 %v11864, %v12145
  %12147 = vmatpush1.msra.mxu0 %v12146
  %12148 = vmatprep.subr.mxu0 0.0
  %v12149 = vand.u32 %v11863, 4294901760
  %v12150 = vsub.f32 %v11863, %v12149
  %12151 = vmatpush1.msra.mxu0 %v12150
  %12152 = vmatprep.subr.mxu0 0.0
  %v12153 = vand.u32 %v11862, 4294901760
  %v12154 = vsub.f32 %v11862, %v12153
  %12155 = vmatpush1.msra.mxu0 %v12154
  %12156 = vmatprep.subr.mxu0 0.0
  %v12157 = vand.u32 %v11861, 4294901760
  %v12158 = vsub.f32 %v11861, %v12157
  %12159 = vmatpush1.msra.mxu0 %v12158
  %12160 = vmatprep.subr.mxu0 0.0
  %v12161 = vand.u32 %v11860, 4294901760
  %v12162 = vsub.f32 %v11860, %v12161
  %12163 = vmatpush1.msra.mxu0 %v12162
  %12164 = vmatprep.subr.mxu0 0.0
  %v12165 = vand.u32 %v11859, 4294901760
  %v12166 = vsub.f32 %v11859, %v12165
  %12167 = vmatpush1.msra.mxu0 %v12166
  %12168 = vmatprep.subr.mxu0 0.0
  %v12169 = vand.u32 %v11858, 4294901760
  %v12170 = vsub.f32 %v11858, %v12169
  %12171 = vmatpush1.msra.mxu0 %v12170
  %12172 = vmatprep.subr.mxu0 0.0
  %v12173 = vand.u32 %v11857, 4294901760
  %v12174 = vsub.f32 %v11857, %v12173
  %12175 = vmatpush1.msra.mxu0 %v12174
  %12176 = vmatprep.subr.mxu0 0.0
  %v12177 = vand.u32 %v11856, 4294901760
  %v12178 = vsub.f32 %v11856, %v12177
  %12179 = vmatpush1.msra.mxu0 %v12178
  %12180 = vmatprep.subr.mxu0 0.0
  %v12181 = vand.u32 %v11855, 4294901760
  %v12182 = vsub.f32 %v11855, %v12181
  %12183 = vmatpush1.msra.mxu0 %v12182
  %12184 = vmatprep.subr.mxu0 0.0
  %12185 = vmatpush2.msra.mxu0 0.0
  %12186 = vmatprep.subr.mxu0 0.0
  %12187 = vmatpush2.msra.mxu0 0.0
  %12188 = vmatprep.subr.mxu0 0.0
  %12189 = vmatpush2.msra.mxu0 0.0
  %12190 = vmatprep.subr.mxu0 0.0
  %12191 = vmatpush2.msra.mxu0 0.0
  %12192 = vmatprep.subr.mxu0 0.0
  %12193 = vmatpush2.msra.mxu0 0.0
  %12194 = vmatprep.subr.mxu0 0.0
  %12195 = vmatpush2.msra.mxu0 0.0
  %12196 = vmatprep.subr.mxu0 0.0
  %12197 = vmatpush2.msra.mxu0 0.0
  %12198 = vmatprep.subr.mxu0 0.0
  %12199 = vmatpush2.msra.mxu0 0.0
  %12200 = vmatprep.subr.mxu0 0.0
  %12201 = vmatpush2.msra.mxu0 0.0
  %12202 = vmatprep.subr.mxu0 0.0
  %12203 = vmatpush2.msra.mxu0 0.0
  %12204 = vmatprep.subr.mxu0 0.0
  %12205 = vmatpush2.msra.mxu0 0.0
  %12206 = vmatprep.subr.mxu0 0.0
  %12207 = vmatpush2.msra.mxu0 0.0
  %12208 = vmatprep.subr.mxu0 0.0
  %12209 = vmatpush2.msra.mxu0 0.0
  %12210 = vmatprep.subr.mxu0 0.0
  %12211 = vmatpush2.msra.mxu0 0.0
  %12212 = vmatprep.subr.mxu0 0.0
  %12213 = vmatpush2.msra.mxu0 0.0
  %12214 = vmatprep.subr.mxu0 0.0
  %12215 = vmatpush2.msra.mxu0 0.0
  %12216 = vmatprep.mubr.f32.mxu0 0.0
  %v12217 = vand.u32 %v11854, 4294901760
  %v12218 = vsub.f32 %v11854, %v12217
  %12219 = vmatmul.mubr.f32.gmra.mxu0 %v12218
  %v12220 = vpop.f32.mrf.mxu0
  %v12221 = vadd.f32 %v12117, %v12220
  %v12222 = vpop.f32.mrf.mxu0
  %12223 = vdwg.mxu0
  %12224 = vmatprep.subr.mxu0 0.0
  %v12225 = vand.u32 %v11870, 4294901760
  %12226 = vmatpush1.msra.mxu0 %v12225
  %12227 = vmatprep.subr.mxu0 0.0
  %v12228 = vand.u32 %v11869, 4294901760
  %12229 = vmatpush1.msra.mxu0 %v12228
  %12230 = vmatprep.subr.mxu0 0.0
  %v12231 = vand.u32 %v11868, 4294901760
  %12232 = vmatpush1.msra.mxu0 %v12231
  %12233 = vmatprep.subr.mxu0 0.0
  %v12234 = vand.u32 %v11867, 4294901760
  %12235 = vmatpush1.msra.mxu0 %v12234
  %12236 = vmatprep.subr.mxu0 0.0
  %v12237 = vand.u32 %v11866, 4294901760
  %12238 = vmatpush1.msra.mxu0 %v12237
  %12239 = vmatprep.subr.mxu0 0.0
  %v12240 = vand.u32 %v11865, 4294901760
  %12241 = vmatpush1.msra.mxu0 %v12240
  %12242 = vmatprep.subr.mxu0 0.0
  %v12243 = vand.u32 %v11864, 4294901760
  %12244 = vmatpush1.msra.mxu0 %v12243
  %12245 = vmatprep.subr.mxu0 0.0
  %v12246 = vand.u32 %v11863, 4294901760
  %12247 = vmatpush1.msra.mxu0 %v12246
  %12248 = vmatprep.subr.mxu0 0.0
  %v12249 = vand.u32 %v11862, 4294901760
  %12250 = vmatpush1.msra.mxu0 %v12249
  %12251 = vmatprep.subr.mxu0 0.0
  %v12252 = vand.u32 %v11861, 4294901760
  %12253 = vmatpush1.msra.mxu0 %v12252
  %12254 = vmatprep.subr.mxu0 0.0
  %v12255 = vand.u32 %v11860, 4294901760
  %12256 = vmatpush1.msra.mxu0 %v12255
  %12257 = vmatprep.subr.mxu0 0.0
  %v12258 = vand.u32 %v11859, 4294901760
  %12259 = vmatpush1.msra.mxu0 %v12258
  %12260 = vmatprep.subr.mxu0 0.0
  %v12261 = vand.u32 %v11858, 4294901760
  %12262 = vmatpush1.msra.mxu0 %v12261
  %12263 = vmatprep.subr.mxu0 0.0
  %v12264 = vand.u32 %v11857, 4294901760
  %12265 = vmatpush1.msra.mxu0 %v12264
  %12266 = vmatprep.subr.mxu0 0.0
  %v12267 = vand.u32 %v11856, 4294901760
  %12268 = vmatpush1.msra.mxu0 %v12267
  %12269 = vmatprep.subr.mxu0 0.0
  %v12270 = vand.u32 %v11855, 4294901760
  %12271 = vmatpush1.msra.mxu0 %v12270
  %12272 = vmatprep.subr.mxu0 0.0
  %12273 = vmatpush2.msra.mxu0 0.0
  %12274 = vmatprep.subr.mxu0 0.0
  %12275 = vmatpush2.msra.mxu0 0.0
  %12276 = vmatprep.subr.mxu0 0.0
  %12277 = vmatpush2.msra.mxu0 0.0
  %12278 = vmatprep.subr.mxu0 0.0
  %12279 = vmatpush2.msra.mxu0 0.0
  %12280 = vmatprep.subr.mxu0 0.0
  %12281 = vmatpush2.msra.mxu0 0.0
  %12282 = vmatprep.subr.mxu0 0.0
  %12283 = vmatpush2.msra.mxu0 0.0
  %12284 = vmatprep.subr.mxu0 0.0
  %12285 = vmatpush2.msra.mxu0 0.0
  %12286 = vmatprep.subr.mxu0 0.0
  %12287 = vmatpush2.msra.mxu0 0.0
  %12288 = vmatprep.subr.mxu0 0.0
  %12289 = vmatpush2.msra.mxu0 0.0
  %12290 = vmatprep.subr.mxu0 0.0
  %12291 = vmatpush2.msra.mxu0 0.0
  %12292 = vmatprep.subr.mxu0 0.0
  %12293 = vmatpush2.msra.mxu0 0.0
  %12294 = vmatprep.subr.mxu0 0.0
  %12295 = vmatpush2.msra.mxu0 0.0
  %12296 = vmatprep.subr.mxu0 0.0
  %12297 = vmatpush2.msra.mxu0 0.0
  %12298 = vmatprep.subr.mxu0 0.0
  %12299 = vmatpush2.msra.mxu0 0.0
  %12300 = vmatprep.subr.mxu0 0.0
  %12301 = vmatpush2.msra.mxu0 0.0
  %12302 = vmatprep.subr.mxu0 0.0
  %12303 = vmatpush2.msra.mxu0 0.0
  %12304 = vmatprep.mubr.f32.mxu0 0.0
  %v12305 = vand.u32 %v11854, 4294901760
  %v12306 = vsub.f32 %v11854, %v12305
  %v12307 = vand.u32 %v12306, 4294901760
  %12308 = vmatmul.mubr.f32.gmra.mxu0 %v12307
  %v12309 = vpop.f32.mrf.mxu0
  %v12310 = vadd.f32 %v12221, %v12309
  %v12311 = vpop.f32.mrf.mxu0
  %12312 = vdwg.mxu0
  %12313 = vmatprep.subr.mxu0 0.0
  %v12314 = vand.u32 %v11870, 4294901760
  %v12315 = vsub.f32 %v11870, %v12314
  %v12316 = vand.u32 %v12315, 4294901760
  %12317 = vmatpush1.msra.mxu0 %v12316
  %12318 = vmatprep.subr.mxu0 0.0
  %v12319 = vand.u32 %v11869, 4294901760
  %v12320 = vsub.f32 %v11869, %v12319
  %v12321 = vand.u32 %v12320, 4294901760
  %12322 = vmatpush1.msra.mxu0 %v12321
  %12323 = vmatprep.subr.mxu0 0.0
  %v12324 = vand.u32 %v11868, 4294901760
  %v12325 = vsub.f32 %v11868, %v12324
  %v12326 = vand.u32 %v12325, 4294901760
  %12327 = vmatpush1.msra.mxu0 %v12326
  %12328 = vmatprep.subr.mxu0 0.0
  %v12329 = vand.u32 %v11867, 4294901760
  %v12330 = vsub.f32 %v11867, %v12329
  %v12331 = vand.u32 %v12330, 4294901760
  %12332 = vmatpush1.msra.mxu0 %v12331
  %12333 = vmatprep.subr.mxu0 0.0
  %v12334 = vand.u32 %v11866, 4294901760
  %v12335 = vsub.f32 %v11866, %v12334
  %v12336 = vand.u32 %v12335, 4294901760
  %12337 = vmatpush1.msra.mxu0 %v12336
  %12338 = vmatprep.subr.mxu0 0.0
  %v12339 = vand.u32 %v11865, 4294901760
  %v12340 = vsub.f32 %v11865, %v12339
  %v12341 = vand.u32 %v12340, 4294901760
  %12342 = vmatpush1.msra.mxu0 %v12341
  %12343 = vmatprep.subr.mxu0 0.0
  %v12344 = vand.u32 %v11864, 4294901760
  %v12345 = vsub.f32 %v11864, %v12344
  %v12346 = vand.u32 %v12345, 4294901760
  %12347 = vmatpush1.msra.mxu0 %v12346
  %12348 = vmatprep.subr.mxu0 0.0
  %v12349 = vand.u32 %v11863, 4294901760
  %v12350 = vsub.f32 %v11863, %v12349
  %v12351 = vand.u32 %v12350, 4294901760
  %12352 = vmatpush1.msra.mxu0 %v12351
  %12353 = vmatprep.subr.mxu0 0.0
  %v12354 = vand.u32 %v11862, 4294901760
  %v12355 = vsub.f32 %v11862, %v12354
  %v12356 = vand.u32 %v12355, 4294901760
  %12357 = vmatpush1.msra.mxu0 %v12356
  %12358 = vmatprep.subr.mxu0 0.0
  %v12359 = vand.u32 %v11861, 4294901760
  %v12360 = vsub.f32 %v11861, %v12359
  %v12361 = vand.u32 %v12360, 4294901760
  %12362 = vmatpush1.msra.mxu0 %v12361
  %12363 = vmatprep.subr.mxu0 0.0
  %v12364 = vand.u32 %v11860, 4294901760
  %v12365 = vsub.f32 %v11860, %v12364
  %v12366 = vand.u32 %v12365, 4294901760
  %12367 = vmatpush1.msra.mxu0 %v12366
  %12368 = vmatprep.subr.mxu0 0.0
  %v12369 = vand.u32 %v11859, 4294901760
  %v12370 = vsub.f32 %v11859, %v12369
  %v12371 = vand.u32 %v12370, 4294901760
  %12372 = vmatpush1.msra.mxu0 %v12371
  %12373 = vmatprep.subr.mxu0 0.0
  %v12374 = vand.u32 %v11858, 4294901760
  %v12375 = vsub.f32 %v11858, %v12374
  %v12376 = vand.u32 %v12375, 4294901760
  %12377 = vmatpush1.msra.mxu0 %v12376
  %12378 = vmatprep.subr.mxu0 0.0
  %v12379 = vand.u32 %v11857, 4294901760
  %v12380 = vsub.f32 %v11857, %v12379
  %v12381 = vand.u32 %v12380, 4294901760
  %12382 = vmatpush1.msra.mxu0 %v12381
  %12383 = vmatprep.subr.mxu0 0.0
  %v12384 = vand.u32 %v11856, 4294901760
  %v12385 = vsub.f32 %v11856, %v12384
  %v12386 = vand.u32 %v12385, 4294901760
  %12387 = vmatpush1.msra.mxu0 %v12386
  %12388 = vmatprep.subr.mxu0 0.0
  %v12389 = vand.u32 %v11855, 4294901760
  %v12390 = vsub.f32 %v11855, %v12389
  %v12391 = vand.u32 %v12390, 4294901760
  %12392 = vmatpush1.msra.mxu0 %v12391
  %12393 = vmatprep.subr.mxu0 0.0
  %12394 = vmatpush2.msra.mxu0 0.0
  %12395 = vmatprep.subr.mxu0 0.0
  %12396 = vmatpush2.msra.mxu0 0.0
  %12397 = vmatprep.subr.mxu0 0.0
  %12398 = vmatpush2.msra.mxu0 0.0
  %12399 = vmatprep.subr.mxu0 0.0
  %12400 = vmatpush2.msra.mxu0 0.0
  %12401 = vmatprep.subr.mxu0 0.0
  %12402 = vmatpush2.msra.mxu0 0.0
  %12403 = vmatprep.subr.mxu0 0.0
  %12404 = vmatpush2.msra.mxu0 0.0
  %12405 = vmatprep.subr.mxu0 0.0
  %12406 = vmatpush2.msra.mxu0 0.0
  %12407 = vmatprep.subr.mxu0 0.0
  %12408 = vmatpush2.msra.mxu0 0.0
  %12409 = vmatprep.subr.mxu0 0.0
  %12410 = vmatpush2.msra.mxu0 0.0
  %12411 = vmatprep.subr.mxu0 0.0
  %12412 = vmatpush2.msra.mxu0 0.0
  %12413 = vmatprep.subr.mxu0 0.0
  %12414 = vmatpush2.msra.mxu0 0.0
  %12415 = vmatprep.subr.mxu0 0.0
  %12416 = vmatpush2.msra.mxu0 0.0
  %12417 = vmatprep.subr.mxu0 0.0
  %12418 = vmatpush2.msra.mxu0 0.0
  %12419 = vmatprep.subr.mxu0 0.0
  %12420 = vmatpush2.msra.mxu0 0.0
  %12421 = vmatprep.subr.mxu0 0.0
  %12422 = vmatpush2.msra.mxu0 0.0
  %12423 = vmatprep.subr.mxu0 0.0
  %12424 = vmatpush2.msra.mxu0 0.0
  %12425 = vmatprep.mubr.f32.mxu0 0.0
  %v12426 = vand.u32 %v11854, 4294901760
  %12427 = vmatmul.mubr.f32.gmra.mxu0 %v12426
  %v12428 = vpop.f32.mrf.mxu0
  %v12429 = vadd.f32 %v12310, %v12428
  %v12430 = vpop.f32.mrf.mxu0
  %12431 = vdwg.mxu0
  %12432 = vmatprep.subr.mxu0 0.0
  %v12433 = vand.u32 %v11870, 4294901760
  %12434 = vmatpush1.msra.mxu0 %v12433
  %12435 = vmatprep.subr.mxu0 0.0
  %v12436 = vand.u32 %v11869, 4294901760
  %12437 = vmatpush1.msra.mxu0 %v12436
  %12438 = vmatprep.subr.mxu0 0.0
  %v12439 = vand.u32 %v11868, 4294901760
  %12440 = vmatpush1.msra.mxu0 %v12439
  %12441 = vmatprep.subr.mxu0 0.0
  %v12442 = vand.u32 %v11867, 4294901760
  %12443 = vmatpush1.msra.mxu0 %v12442
  %12444 = vmatprep.subr.mxu0 0.0
  %v12445 = vand.u32 %v11866, 4294901760
  %12446 = vmatpush1.msra.mxu0 %v12445
  %12447 = vmatprep.subr.mxu0 0.0
  %v12448 = vand.u32 %v11865, 4294901760
  %12449 = vmatpush1.msra.mxu0 %v12448
  %12450 = vmatprep.subr.mxu0 0.0
  %v12451 = vand.u32 %v11864, 4294901760
  %12452 = vmatpush1.msra.mxu0 %v12451
  %12453 = vmatprep.subr.mxu0 0.0
  %v12454 = vand.u32 %v11863, 4294901760
  %12455 = vmatpush1.msra.mxu0 %v12454
  %12456 = vmatprep.subr.mxu0 0.0
  %v12457 = vand.u32 %v11862, 4294901760
  %12458 = vmatpush1.msra.mxu0 %v12457
  %12459 = vmatprep.subr.mxu0 0.0
  %v12460 = vand.u32 %v11861, 4294901760
  %12461 = vmatpush1.msra.mxu0 %v12460
  %12462 = vmatprep.subr.mxu0 0.0
  %v12463 = vand.u32 %v11860, 4294901760
  %12464 = vmatpush1.msra.mxu0 %v12463
  %12465 = vmatprep.subr.mxu0 0.0
  %v12466 = vand.u32 %v11859, 4294901760
  %12467 = vmatpush1.msra.mxu0 %v12466
  %12468 = vmatprep.subr.mxu0 0.0
  %v12469 = vand.u32 %v11858, 4294901760
  %12470 = vmatpush1.msra.mxu0 %v12469
  %12471 = vmatprep.subr.mxu0 0.0
  %v12472 = vand.u32 %v11857, 4294901760
  %12473 = vmatpush1.msra.mxu0 %v12472
  %12474 = vmatprep.subr.mxu0 0.0
  %v12475 = vand.u32 %v11856, 4294901760
  %12476 = vmatpush1.msra.mxu0 %v12475
  %12477 = vmatprep.subr.mxu0 0.0
  %v12478 = vand.u32 %v11855, 4294901760
  %12479 = vmatpush1.msra.mxu0 %v12478
  %12480 = vmatprep.subr.mxu0 0.0
  %12481 = vmatpush2.msra.mxu0 0.0
  %12482 = vmatprep.subr.mxu0 0.0
  %12483 = vmatpush2.msra.mxu0 0.0
  %12484 = vmatprep.subr.mxu0 0.0
  %12485 = vmatpush2.msra.mxu0 0.0
  %12486 = vmatprep.subr.mxu0 0.0
  %12487 = vmatpush2.msra.mxu0 0.0
  %12488 = vmatprep.subr.mxu0 0.0
  %12489 = vmatpush2.msra.mxu0 0.0
  %12490 = vmatprep.subr.mxu0 0.0
  %12491 = vmatpush2.msra.mxu0 0.0
  %12492 = vmatprep.subr.mxu0 0.0
  %12493 = vmatpush2.msra.mxu0 0.0
  %12494 = vmatprep.subr.mxu0 0.0
  %12495 = vmatpush2.msra.mxu0 0.0
  %12496 = vmatprep.subr.mxu0 0.0
  %12497 = vmatpush2.msra.mxu0 0.0
  %12498 = vmatprep.subr.mxu0 0.0
  %12499 = vmatpush2.msra.mxu0 0.0
  %12500 = vmatprep.subr.mxu0 0.0
  %12501 = vmatpush2.msra.mxu0 0.0
  %12502 = vmatprep.subr.mxu0 0.0
  %12503 = vmatpush2.msra.mxu0 0.0
  %12504 = vmatprep.subr.mxu0 0.0
  %12505 = vmatpush2.msra.mxu0 0.0
  %12506 = vmatprep.subr.mxu0 0.0
  %12507 = vmatpush2.msra.mxu0 0.0
  %12508 = vmatprep.subr.mxu0 0.0
  %12509 = vmatpush2.msra.mxu0 0.0
  %12510 = vmatprep.subr.mxu0 0.0
  %12511 = vmatpush2.msra.mxu0 0.0
  %12512 = vmatprep.mubr.f32.mxu0 0.0
  %v12513 = vand.u32 %v11854, 4294901760
  %12514 = vmatmul.mubr.f32.gmra.mxu0 %v12513
  %v12515 = vpop.f32.mrf.mxu0
  %v12516 = vadd.f32 %v12429, %v12515
  %v12517 = vpop.f32.mrf.mxu0
  %12518 = vdwg.mxu0
  %v12519 = vld [vmem:[%s10] sm:$0xff]
  %v12520 = vld [vmem:[%s10 + $0x8] sm:$0xff]
  %v12521 = vld [vmem:[%s10 + $0x10] sm:$0xff]
  %v12522 = vld [vmem:[%s10 + $0x18] sm:$0xff]
  %v12523 = vld [vmem:[%s10 + $0x20] sm:$0xff]
  %v12524 = vld [vmem:[%s10 + $0x28] sm:$0xff]
  %v12525 = vld [vmem:[%s10 + $0x30] sm:$0xff]
  %v12526 = vld [vmem:[%s10 + $0x38] sm:$0xff]
  %v12527 = vld [vmem:[%s11] sm:$0x1]
  %v12529 = vlaneseq
  %v12530 = vshrl.u32 %v12529, 7
  %v12531 = vsub.s32 0, %v12530
  %v12532 = vrot.slane %v12527, %v12531
  %v12535 = vsel %vm248, %v12516, 0
  %12537 = vmatprep.subr.mxu0 0.0
  %12538 = vmatpush1.msra.mxu0 0.0
  %12539 = vmatprep.subr.mxu0 0.0
  %12540 = vmatpush1.msra.mxu0 0.0
  %12541 = vmatprep.subr.mxu0 0.0
  %12542 = vmatpush1.msra.mxu0 0.0
  %12543 = vmatprep.subr.mxu0 0.0
  %12544 = vmatpush1.msra.mxu0 0.0
  %12545 = vmatprep.subr.mxu0 0.0
  %12546 = vmatpush1.msra.mxu0 0.0
  %12547 = vmatprep.subr.mxu0 0.0
  %12548 = vmatpush1.msra.mxu0 0.0
  %12549 = vmatprep.subr.mxu0 0.0
  %12550 = vmatpush1.msra.mxu0 0.0
  %12551 = vmatprep.subr.mxu0 0.0
  %12552 = vmatpush1.msra.mxu0 0.0
  %12553 = vmatprep.subr.mxu0 0.0
  %v12554 = vand.u32 %v12526, 4294901760
  %12555 = vmatpush1.msra.mxu0 %v12554
  %12556 = vmatprep.subr.mxu0 0.0
  %v12557 = vand.u32 %v12525, 4294901760
  %12558 = vmatpush1.msra.mxu0 %v12557
  %12559 = vmatprep.subr.mxu0 0.0
  %v12560 = vand.u32 %v12524, 4294901760
  %12561 = vmatpush1.msra.mxu0 %v12560
  %12562 = vmatprep.subr.mxu0 0.0
  %v12563 = vand.u32 %v12523, 4294901760
  %12564 = vmatpush1.msra.mxu0 %v12563
  %12565 = vmatprep.subr.mxu0 0.0
  %v12566 = vand.u32 %v12522, 4294901760
  %12567 = vmatpush1.msra.mxu0 %v12566
  %12568 = vmatprep.subr.mxu0 0.0
  %v12569 = vand.u32 %v12521, 4294901760
  %12570 = vmatpush1.msra.mxu0 %v12569
  %12571 = vmatprep.subr.mxu0 0.0
  %v12572 = vand.u32 %v12520, 4294901760
  %12573 = vmatpush1.msra.mxu0 %v12572
  %12574 = vmatprep.subr.mxu0 0.0
  %v12575 = vand.u32 %v12519, 4294901760
  %12576 = vmatpush1.msra.mxu0 %v12575
  %12577 = vmatprep.subr.mxu0 0.0
  %12578 = vmatpush2.msra.mxu0 0.0
  %12579 = vmatprep.subr.mxu0 0.0
  %12580 = vmatpush2.msra.mxu0 0.0
  %12581 = vmatprep.subr.mxu0 0.0
  %12582 = vmatpush2.msra.mxu0 0.0
  %12583 = vmatprep.subr.mxu0 0.0
  %12584 = vmatpush2.msra.mxu0 0.0
  %12585 = vmatprep.subr.mxu0 0.0
  %12586 = vmatpush2.msra.mxu0 0.0
  %12587 = vmatprep.subr.mxu0 0.0
  %12588 = vmatpush2.msra.mxu0 0.0
  %12589 = vmatprep.subr.mxu0 0.0
  %12590 = vmatpush2.msra.mxu0 0.0
  %12591 = vmatprep.subr.mxu0 0.0
  %12592 = vmatpush2.msra.mxu0 0.0
  %12593 = vmatprep.subr.mxu0 0.0
  %12594 = vmatpush2.msra.mxu0 0.0
  %12595 = vmatprep.subr.mxu0 0.0
  %12596 = vmatpush2.msra.mxu0 0.0
  %12597 = vmatprep.subr.mxu0 0.0
  %12598 = vmatpush2.msra.mxu0 0.0
  %12599 = vmatprep.subr.mxu0 0.0
  %12600 = vmatpush2.msra.mxu0 0.0
  %12601 = vmatprep.subr.mxu0 0.0
  %12602 = vmatpush2.msra.mxu0 0.0
  %12603 = vmatprep.subr.mxu0 0.0
  %12604 = vmatpush2.msra.mxu0 0.0
  %12605 = vmatprep.subr.mxu0 0.0
  %12606 = vmatpush2.msra.mxu0 0.0
  %12607 = vmatprep.subr.mxu0 0.0
  %12608 = vmatpush2.msra.mxu0 0.0
  %12609 = vmatprep.mubr.f32.mxu0 0.0
  %v12610 = vand.u32 %v12535, 4294901760
  %v12611 = vsub.f32 %v12535, %v12610
  %v12612 = vand.u32 %v12611, 4294901760
  %v12613 = vsub.f32 %v12611, %v12612
  %v12614 = vand.u32 %v12613, 4294901760
  %12615 = vmatmul.mubr.f32.gmra.mxu0 %v12614
  %v12616 = vpop.f32.mrf.mxu0
  %v12617 = vadd.f32 %v12532, %v12616
  %v12618 = vpop.f32.mrf.mxu0
  %12619 = vdwg.mxu0
  %12620 = vmatprep.subr.mxu0 0.0
  %12621 = vmatpush1.msra.mxu0 0.0
  %12622 = vmatprep.subr.mxu0 0.0
  %12623 = vmatpush1.msra.mxu0 0.0
  %12624 = vmatprep.subr.mxu0 0.0
  %12625 = vmatpush1.msra.mxu0 0.0
  %12626 = vmatprep.subr.mxu0 0.0
  %12627 = vmatpush1.msra.mxu0 0.0
  %12628 = vmatprep.subr.mxu0 0.0
  %12629 = vmatpush1.msra.mxu0 0.0
  %12630 = vmatprep.subr.mxu0 0.0
  %12631 = vmatpush1.msra.mxu0 0.0
  %12632 = vmatprep.subr.mxu0 0.0
  %12633 = vmatpush1.msra.mxu0 0.0
  %12634 = vmatprep.subr.mxu0 0.0
  %12635 = vmatpush1.msra.mxu0 0.0
  %12636 = vmatprep.subr.mxu0 0.0
  %v12637 = vand.u32 %v12526, 4294901760
  %v12638 = vsub.f32 %v12526, %v12637
  %v12639 = vand.u32 %v12638, 4294901760
  %v12640 = vsub.f32 %v12638, %v12639
  %v12641 = vand.u32 %v12640, 4294901760
  %12642 = vmatpush1.msra.mxu0 %v12641
  %12643 = vmatprep.subr.mxu0 0.0
  %v12644 = vand.u32 %v12525, 4294901760
  %v12645 = vsub.f32 %v12525, %v12644
  %v12646 = vand.u32 %v12645, 4294901760
  %v12647 = vsub.f32 %v12645, %v12646
  %v12648 = vand.u32 %v12647, 4294901760
  %12649 = vmatpush1.msra.mxu0 %v12648
  %12650 = vmatprep.subr.mxu0 0.0
  %v12651 = vand.u32 %v12524, 4294901760
  %v12652 = vsub.f32 %v12524, %v12651
  %v12653 = vand.u32 %v12652, 4294901760
  %v12654 = vsub.f32 %v12652, %v12653
  %v12655 = vand.u32 %v12654, 4294901760
  %12656 = vmatpush1.msra.mxu0 %v12655
  %12657 = vmatprep.subr.mxu0 0.0
  %v12658 = vand.u32 %v12523, 4294901760
  %v12659 = vsub.f32 %v12523, %v12658
  %v12660 = vand.u32 %v12659, 4294901760
  %v12661 = vsub.f32 %v12659, %v12660
  %v12662 = vand.u32 %v12661, 4294901760
  %12663 = vmatpush1.msra.mxu0 %v12662
  %12664 = vmatprep.subr.mxu0 0.0
  %v12665 = vand.u32 %v12522, 4294901760
  %v12666 = vsub.f32 %v12522, %v12665
  %v12667 = vand.u32 %v12666, 4294901760
  %v12668 = vsub.f32 %v12666, %v12667
  %v12669 = vand.u32 %v12668, 4294901760
  %12670 = vmatpush1.msra.mxu0 %v12669
  %12671 = vmatprep.subr.mxu0 0.0
  %v12672 = vand.u32 %v12521, 4294901760
  %v12673 = vsub.f32 %v12521, %v12672
  %v12674 = vand.u32 %v12673, 4294901760
  %v12675 = vsub.f32 %v12673, %v12674
  %v12676 = vand.u32 %v12675, 4294901760
  %12677 = vmatpush1.msra.mxu0 %v12676
  %12678 = vmatprep.subr.mxu0 0.0
  %v12679 = vand.u32 %v12520, 4294901760
  %v12680 = vsub.f32 %v12520, %v12679
  %v12681 = vand.u32 %v12680, 4294901760
  %v12682 = vsub.f32 %v12680, %v12681
  %v12683 = vand.u32 %v12682, 4294901760
  %12684 = vmatpush1.msra.mxu0 %v12683
  %12685 = vmatprep.subr.mxu0 0.0
  %v12686 = vand.u32 %v12519, 4294901760
  %v12687 = vsub.f32 %v12519, %v12686
  %v12688 = vand.u32 %v12687, 4294901760
  %v12689 = vsub.f32 %v12687, %v12688
  %v12690 = vand.u32 %v12689, 4294901760
  %12691 = vmatpush1.msra.mxu0 %v12690
  %12692 = vmatprep.subr.mxu0 0.0
  %12693 = vmatpush2.msra.mxu0 0.0
  %12694 = vmatprep.subr.mxu0 0.0
  %12695 = vmatpush2.msra.mxu0 0.0
  %12696 = vmatprep.subr.mxu0 0.0
  %12697 = vmatpush2.msra.mxu0 0.0
  %12698 = vmatprep.subr.mxu0 0.0
  %12699 = vmatpush2.msra.mxu0 0.0
  %12700 = vmatprep.subr.mxu0 0.0
  %12701 = vmatpush2.msra.mxu0 0.0
  %12702 = vmatprep.subr.mxu0 0.0
  %12703 = vmatpush2.msra.mxu0 0.0
  %12704 = vmatprep.subr.mxu0 0.0
  %12705 = vmatpush2.msra.mxu0 0.0
  %12706 = vmatprep.subr.mxu0 0.0
  %12707 = vmatpush2.msra.mxu0 0.0
  %12708 = vmatprep.subr.mxu0 0.0
  %12709 = vmatpush2.msra.mxu0 0.0
  %12710 = vmatprep.subr.mxu0 0.0
  %12711 = vmatpush2.msra.mxu0 0.0
  %12712 = vmatprep.subr.mxu0 0.0
  %12713 = vmatpush2.msra.mxu0 0.0
  %12714 = vmatprep.subr.mxu0 0.0
  %12715 = vmatpush2.msra.mxu0 0.0
  %12716 = vmatprep.subr.mxu0 0.0
  %12717 = vmatpush2.msra.mxu0 0.0
  %12718 = vmatprep.subr.mxu0 0.0
  %12719 = vmatpush2.msra.mxu0 0.0
  %12720 = vmatprep.subr.mxu0 0.0
  %12721 = vmatpush2.msra.mxu0 0.0
  %12722 = vmatprep.subr.mxu0 0.0
  %12723 = vmatpush2.msra.mxu0 0.0
  %12724 = vmatprep.mubr.f32.mxu0 0.0
  %v12725 = vand.u32 %v12535, 4294901760
  %12726 = vmatmul.mubr.f32.gmra.mxu0 %v12725
  %v12727 = vpop.f32.mrf.mxu0
  %v12728 = vadd.f32 %v12617, %v12727
  %v12729 = vpop.f32.mrf.mxu0
  %12730 = vdwg.mxu0
  %12731 = vmatprep.subr.mxu0 0.0
  %12732 = vmatpush1.msra.mxu0 0.0
  %12733 = vmatprep.subr.mxu0 0.0
  %12734 = vmatpush1.msra.mxu0 0.0
  %12735 = vmatprep.subr.mxu0 0.0
  %12736 = vmatpush1.msra.mxu0 0.0
  %12737 = vmatprep.subr.mxu0 0.0
  %12738 = vmatpush1.msra.mxu0 0.0
  %12739 = vmatprep.subr.mxu0 0.0
  %12740 = vmatpush1.msra.mxu0 0.0
  %12741 = vmatprep.subr.mxu0 0.0
  %12742 = vmatpush1.msra.mxu0 0.0
  %12743 = vmatprep.subr.mxu0 0.0
  %12744 = vmatpush1.msra.mxu0 0.0
  %12745 = vmatprep.subr.mxu0 0.0
  %12746 = vmatpush1.msra.mxu0 0.0
  %12747 = vmatprep.subr.mxu0 0.0
  %v12748 = vand.u32 %v12526, 4294901760
  %v12749 = vsub.f32 %v12526, %v12748
  %12750 = vmatpush1.msra.mxu0 %v12749
  %12751 = vmatprep.subr.mxu0 0.0
  %v12752 = vand.u32 %v12525, 4294901760
  %v12753 = vsub.f32 %v12525, %v12752
  %12754 = vmatpush1.msra.mxu0 %v12753
  %12755 = vmatprep.subr.mxu0 0.0
  %v12756 = vand.u32 %v12524, 4294901760
  %v12757 = vsub.f32 %v12524, %v12756
  %12758 = vmatpush1.msra.mxu0 %v12757
  %12759 = vmatprep.subr.mxu0 0.0
  %v12760 = vand.u32 %v12523, 4294901760
  %v12761 = vsub.f32 %v12523, %v12760
  %12762 = vmatpush1.msra.mxu0 %v12761
  %12763 = vmatprep.subr.mxu0 0.0
  %v12764 = vand.u32 %v12522, 4294901760
  %v12765 = vsub.f32 %v12522, %v12764
  %12766 = vmatpush1.msra.mxu0 %v12765
  %12767 = vmatprep.subr.mxu0 0.0
  %v12768 = vand.u32 %v12521, 4294901760
  %v12769 = vsub.f32 %v12521, %v12768
  %12770 = vmatpush1.msra.mxu0 %v12769
  %12771 = vmatprep.subr.mxu0 0.0
  %v12772 = vand.u32 %v12520, 4294901760
  %v12773 = vsub.f32 %v12520, %v12772
  %12774 = vmatpush1.msra.mxu0 %v12773
  %12775 = vmatprep.subr.mxu0 0.0
  %v12776 = vand.u32 %v12519, 4294901760
  %v12777 = vsub.f32 %v12519, %v12776
  %12778 = vmatpush1.msra.mxu0 %v12777
  %12779 = vmatprep.subr.mxu0 0.0
  %12780 = vmatpush2.msra.mxu0 0.0
  %12781 = vmatprep.subr.mxu0 0.0
  %12782 = vmatpush2.msra.mxu0 0.0
  %12783 = vmatprep.subr.mxu0 0.0
  %12784 = vmatpush2.msra.mxu0 0.0
  %12785 = vmatprep.subr.mxu0 0.0
  %12786 = vmatpush2.msra.mxu0 0.0
  %12787 = vmatprep.subr.mxu0 0.0
  %12788 = vmatpush2.msra.mxu0 0.0
  %12789 = vmatprep.subr.mxu0 0.0
  %12790 = vmatpush2.msra.mxu0 0.0
  %12791 = vmatprep.subr.mxu0 0.0
  %12792 = vmatpush2.msra.mxu0 0.0
  %12793 = vmatprep.subr.mxu0 0.0
  %12794 = vmatpush2.msra.mxu0 0.0
  %12795 = vmatprep.subr.mxu0 0.0
  %12796 = vmatpush2.msra.mxu0 0.0
  %12797 = vmatprep.subr.mxu0 0.0
  %12798 = vmatpush2.msra.mxu0 0.0
  %12799 = vmatprep.subr.mxu0 0.0
  %12800 = vmatpush2.msra.mxu0 0.0
  %12801 = vmatprep.subr.mxu0 0.0
  %12802 = vmatpush2.msra.mxu0 0.0
  %12803 = vmatprep.subr.mxu0 0.0
  %12804 = vmatpush2.msra.mxu0 0.0
  %12805 = vmatprep.subr.mxu0 0.0
  %12806 = vmatpush2.msra.mxu0 0.0
  %12807 = vmatprep.subr.mxu0 0.0
  %12808 = vmatpush2.msra.mxu0 0.0
  %12809 = vmatprep.subr.mxu0 0.0
  %12810 = vmatpush2.msra.mxu0 0.0
  %12811 = vmatprep.mubr.f32.mxu0 0.0
  %v12812 = vand.u32 %v12535, 4294901760
  %v12813 = vsub.f32 %v12535, %v12812
  %12814 = vmatmul.mubr.f32.gmra.mxu0 %v12813
  %v12815 = vpop.f32.mrf.mxu0
  %v12816 = vadd.f32 %v12728, %v12815
  %v12817 = vpop.f32.mrf.mxu0
  %12818 = vdwg.mxu0
  %12819 = vmatprep.subr.mxu0 0.0
  %12820 = vmatpush1.msra.mxu0 0.0
  %12821 = vmatprep.subr.mxu0 0.0
  %12822 = vmatpush1.msra.mxu0 0.0
  %12823 = vmatprep.subr.mxu0 0.0
  %12824 = vmatpush1.msra.mxu0 0.0
  %12825 = vmatprep.subr.mxu0 0.0
  %12826 = vmatpush1.msra.mxu0 0.0
  %12827 = vmatprep.subr.mxu0 0.0
  %12828 = vmatpush1.msra.mxu0 0.0
  %12829 = vmatprep.subr.mxu0 0.0
  %12830 = vmatpush1.msra.mxu0 0.0
  %12831 = vmatprep.subr.mxu0 0.0
  %12832 = vmatpush1.msra.mxu0 0.0
  %12833 = vmatprep.subr.mxu0 0.0
  %12834 = vmatpush1.msra.mxu0 0.0
  %12835 = vmatprep.subr.mxu0 0.0
  %v12836 = vand.u32 %v12526, 4294901760
  %12837 = vmatpush1.msra.mxu0 %v12836
  %12838 = vmatprep.subr.mxu0 0.0
  %v12839 = vand.u32 %v12525, 4294901760
  %12840 = vmatpush1.msra.mxu0 %v12839
  %12841 = vmatprep.subr.mxu0 0.0
  %v12842 = vand.u32 %v12524, 4294901760
  %12843 = vmatpush1.msra.mxu0 %v12842
  %12844 = vmatprep.subr.mxu0 0.0
  %v12845 = vand.u32 %v12523, 4294901760
  %12846 = vmatpush1.msra.mxu0 %v12845
  %12847 = vmatprep.subr.mxu0 0.0
  %v12848 = vand.u32 %v12522, 4294901760
  %12849 = vmatpush1.msra.mxu0 %v12848
  %12850 = vmatprep.subr.mxu0 0.0
  %v12851 = vand.u32 %v12521, 4294901760
  %12852 = vmatpush1.msra.mxu0 %v12851
  %12853 = vmatprep.subr.mxu0 0.0
  %v12854 = vand.u32 %v12520, 4294901760
  %12855 = vmatpush1.msra.mxu0 %v12854
  %12856 = vmatprep.subr.mxu0 0.0
  %v12857 = vand.u32 %v12519, 4294901760
  %12858 = vmatpush1.msra.mxu0 %v12857
  %12859 = vmatprep.subr.mxu0 0.0
  %12860 = vmatpush2.msra.mxu0 0.0
  %12861 = vmatprep.subr.mxu0 0.0
  %12862 = vmatpush2.msra.mxu0 0.0
  %12863 = vmatprep.subr.mxu0 0.0
  %12864 = vmatpush2.msra.mxu0 0.0
  %12865 = vmatprep.subr.mxu0 0.0
  %12866 = vmatpush2.msra.mxu0 0.0
  %12867 = vmatprep.subr.mxu0 0.0
  %12868 = vmatpush2.msra.mxu0 0.0
  %12869 = vmatprep.subr.mxu0 0.0
  %12870 = vmatpush2.msra.mxu0 0.0
  %12871 = vmatprep.subr.mxu0 0.0
  %12872 = vmatpush2.msra.mxu0 0.0
  %12873 = vmatprep.subr.mxu0 0.0
  %12874 = vmatpush2.msra.mxu0 0.0
  %12875 = vmatprep.subr.mxu0 0.0
  %12876 = vmatpush2.msra.mxu0 0.0
  %12877 = vmatprep.subr.mxu0 0.0
  %12878 = vmatpush2.msra.mxu0 0.0
  %12879 = vmatprep.subr.mxu0 0.0
  %12880 = vmatpush2.msra.mxu0 0.0
  %12881 = vmatprep.subr.mxu0 0.0
  %12882 = vmatpush2.msra.mxu0 0.0
  %12883 = vmatprep.subr.mxu0 0.0
  %12884 = vmatpush2.msra.mxu0 0.0
  %12885 = vmatprep.subr.mxu0 0.0
  %12886 = vmatpush2.msra.mxu0 0.0
  %12887 = vmatprep.subr.mxu0 0.0
  %12888 = vmatpush2.msra.mxu0 0.0
  %12889 = vmatprep.subr.mxu0 0.0
  %12890 = vmatpush2.msra.mxu0 0.0
  %12891 = vmatprep.mubr.f32.mxu0 0.0
  %v12892 = vand.u32 %v12535, 4294901760
  %v12893 = vsub.f32 %v12535, %v12892
  %v12894 = vand.u32 %v12893, 4294901760
  %12895 = vmatmul.mubr.f32.gmra.mxu0 %v12894
  %v12896 = vpop.f32.mrf.mxu0
  %v12897 = vadd.f32 %v12816, %v12896
  %v12898 = vpop.f32.mrf.mxu0
  %12899 = vdwg.mxu0
  %12900 = vmatprep.subr.mxu0 0.0
  %12901 = vmatpush1.msra.mxu0 0.0
  %12902 = vmatprep.subr.mxu0 0.0
  %12903 = vmatpush1.msra.mxu0 0.0
  %12904 = vmatprep.subr.mxu0 0.0
  %12905 = vmatpush1.msra.mxu0 0.0
  %12906 = vmatprep.subr.mxu0 0.0
  %12907 = vmatpush1.msra.mxu0 0.0
  %12908 = vmatprep.subr.mxu0 0.0
  %12909 = vmatpush1.msra.mxu0 0.0
  %12910 = vmatprep.subr.mxu0 0.0
  %12911 = vmatpush1.msra.mxu0 0.0
  %12912 = vmatprep.subr.mxu0 0.0
  %12913 = vmatpush1.msra.mxu0 0.0
  %12914 = vmatprep.subr.mxu0 0.0
  %12915 = vmatpush1.msra.mxu0 0.0
  %12916 = vmatprep.subr.mxu0 0.0
  %v12917 = vand.u32 %v12526, 4294901760
  %v12918 = vsub.f32 %v12526, %v12917
  %v12919 = vand.u32 %v12918, 4294901760
  %12920 = vmatpush1.msra.mxu0 %v12919
  %12921 = vmatprep.subr.mxu0 0.0
  %v12922 = vand.u32 %v12525, 4294901760
  %v12923 = vsub.f32 %v12525, %v12922
  %v12924 = vand.u32 %v12923, 4294901760
  %12925 = vmatpush1.msra.mxu0 %v12924
  %12926 = vmatprep.subr.mxu0 0.0
  %v12927 = vand.u32 %v12524, 4294901760
  %v12928 = vsub.f32 %v12524, %v12927
  %v12929 = vand.u32 %v12928, 4294901760
  %12930 = vmatpush1.msra.mxu0 %v12929
  %12931 = vmatprep.subr.mxu0 0.0
  %v12932 = vand.u32 %v12523, 4294901760
  %v12933 = vsub.f32 %v12523, %v12932
  %v12934 = vand.u32 %v12933, 4294901760
  %12935 = vmatpush1.msra.mxu0 %v12934
  %12936 = vmatprep.subr.mxu0 0.0
  %v12937 = vand.u32 %v12522, 4294901760
  %v12938 = vsub.f32 %v12522, %v12937
  %v12939 = vand.u32 %v12938, 4294901760
  %12940 = vmatpush1.msra.mxu0 %v12939
  %12941 = vmatprep.subr.mxu0 0.0
  %v12942 = vand.u32 %v12521, 4294901760
  %v12943 = vsub.f32 %v12521, %v12942
  %v12944 = vand.u32 %v12943, 4294901760
  %12945 = vmatpush1.msra.mxu0 %v12944
  %12946 = vmatprep.subr.mxu0 0.0
  %v12947 = vand.u32 %v12520, 4294901760
  %v12948 = vsub.f32 %v12520, %v12947
  %v12949 = vand.u32 %v12948, 4294901760
  %12950 = vmatpush1.msra.mxu0 %v12949
  %12951 = vmatprep.subr.mxu0 0.0
  %v12952 = vand.u32 %v12519, 4294901760
  %v12953 = vsub.f32 %v12519, %v12952
  %v12954 = vand.u32 %v12953, 4294901760
  %12955 = vmatpush1.msra.mxu0 %v12954
  %12956 = vmatprep.subr.mxu0 0.0
  %12957 = vmatpush2.msra.mxu0 0.0
  %12958 = vmatprep.subr.mxu0 0.0
  %12959 = vmatpush2.msra.mxu0 0.0
  %12960 = vmatprep.subr.mxu0 0.0
  %12961 = vmatpush2.msra.mxu0 0.0
  %12962 = vmatprep.subr.mxu0 0.0
  %12963 = vmatpush2.msra.mxu0 0.0
  %12964 = vmatprep.subr.mxu0 0.0
  %12965 = vmatpush2.msra.mxu0 0.0
  %12966 = vmatprep.subr.mxu0 0.0
  %12967 = vmatpush2.msra.mxu0 0.0
  %12968 = vmatprep.subr.mxu0 0.0
  %12969 = vmatpush2.msra.mxu0 0.0
  %12970 = vmatprep.subr.mxu0 0.0
  %12971 = vmatpush2.msra.mxu0 0.0
  %12972 = vmatprep.subr.mxu0 0.0
  %12973 = vmatpush2.msra.mxu0 0.0
  %12974 = vmatprep.subr.mxu0 0.0
  %12975 = vmatpush2.msra.mxu0 0.0
  %12976 = vmatprep.subr.mxu0 0.0
  %12977 = vmatpush2.msra.mxu0 0.0
  %12978 = vmatprep.subr.mxu0 0.0
  %12979 = vmatpush2.msra.mxu0 0.0
  %12980 = vmatprep.subr.mxu0 0.0
  %12981 = vmatpush2.msra.mxu0 0.0
  %12982 = vmatprep.subr.mxu0 0.0
  %12983 = vmatpush2.msra.mxu0 0.0
  %12984 = vmatprep.subr.mxu0 0.0
  %12985 = vmatpush2.msra.mxu0 0.0
  %12986 = vmatprep.subr.mxu0 0.0
  %12987 = vmatpush2.msra.mxu0 0.0
  %12988 = vmatprep.mubr.f32.mxu0 0.0
  %v12989 = vand.u32 %v12535, 4294901760
  %12990 = vmatmul.mubr.f32.gmra.mxu0 %v12989
  %v12991 = vpop.f32.mrf.mxu0
  %v12992 = vadd.f32 %v12897, %v12991
  %v12993 = vpop.f32.mrf.mxu0
  %12994 = vdwg.mxu0
  %12995 = vmatprep.subr.mxu0 0.0
  %12996 = vmatpush1.msra.mxu0 0.0
  %12997 = vmatprep.subr.mxu0 0.0
  %12998 = vmatpush1.msra.mxu0 0.0
  %12999 = vmatprep.subr.mxu0 0.0
  %13000 = vmatpush1.msra.mxu0 0.0
  %13001 = vmatprep.subr.mxu0 0.0
  %13002 = vmatpush1.msra.mxu0 0.0
  %13003 = vmatprep.subr.mxu0 0.0
  %13004 = vmatpush1.msra.mxu0 0.0
  %13005 = vmatprep.subr.mxu0 0.0
  %13006 = vmatpush1.msra.mxu0 0.0
  %13007 = vmatprep.subr.mxu0 0.0
  %13008 = vmatpush1.msra.mxu0 0.0
  %13009 = vmatprep.subr.mxu0 0.0
  %13010 = vmatpush1.msra.mxu0 0.0
  %13011 = vmatprep.subr.mxu0 0.0
  %v13012 = vand.u32 %v12526, 4294901760
  %13013 = vmatpush1.msra.mxu0 %v13012
  %13014 = vmatprep.subr.mxu0 0.0
  %v13015 = vand.u32 %v12525, 4294901760
  %13016 = vmatpush1.msra.mxu0 %v13015
  %13017 = vmatprep.subr.mxu0 0.0
  %v13018 = vand.u32 %v12524, 4294901760
  %13019 = vmatpush1.msra.mxu0 %v13018
  %13020 = vmatprep.subr.mxu0 0.0
  %v13021 = vand.u32 %v12523, 4294901760
  %13022 = vmatpush1.msra.mxu0 %v13021
  %13023 = vmatprep.subr.mxu0 0.0
  %v13024 = vand.u32 %v12522, 4294901760
  %13025 = vmatpush1.msra.mxu0 %v13024
  %13026 = vmatprep.subr.mxu0 0.0
  %v13027 = vand.u32 %v12521, 4294901760
  %13028 = vmatpush1.msra.mxu0 %v13027
  %13029 = vmatprep.subr.mxu0 0.0
  %v13030 = vand.u32 %v12520, 4294901760
  %13031 = vmatpush1.msra.mxu0 %v13030
  %13032 = vmatprep.subr.mxu0 0.0
  %v13033 = vand.u32 %v12519, 4294901760
  %13034 = vmatpush1.msra.mxu0 %v13033
  %13035 = vmatprep.subr.mxu0 0.0
  %13036 = vmatpush2.msra.mxu0 0.0
  %13037 = vmatprep.subr.mxu0 0.0
  %13038 = vmatpush2.msra.mxu0 0.0
  %13039 = vmatprep.subr.mxu0 0.0
  %13040 = vmatpush2.msra.mxu0 0.0
  %13041 = vmatprep.subr.mxu0 0.0
  %13042 = vmatpush2.msra.mxu0 0.0
  %13043 = vmatprep.subr.mxu0 0.0
  %13044 = vmatpush2.msra.mxu0 0.0
  %13045 = vmatprep.subr.mxu0 0.0
  %13046 = vmatpush2.msra.mxu0 0.0
  %13047 = vmatprep.subr.mxu0 0.0
  %13048 = vmatpush2.msra.mxu0 0.0
  %13049 = vmatprep.subr.mxu0 0.0
  %13050 = vmatpush2.msra.mxu0 0.0
  %13051 = vmatprep.subr.mxu0 0.0
  %13052 = vmatpush2.msra.mxu0 0.0
  %13053 = vmatprep.subr.mxu0 0.0
  %13054 = vmatpush2.msra.mxu0 0.0
  %13055 = vmatprep.subr.mxu0 0.0
  %13056 = vmatpush2.msra.mxu0 0.0
  %13057 = vmatprep.subr.mxu0 0.0
  %13058 = vmatpush2.msra.mxu0 0.0
  %13059 = vmatprep.subr.mxu0 0.0
  %13060 = vmatpush2.msra.mxu0 0.0
  %13061 = vmatprep.subr.mxu0 0.0
  %13062 = vmatpush2.msra.mxu0 0.0
  %13063 = vmatprep.subr.mxu0 0.0
  %13064 = vmatpush2.msra.mxu0 0.0
  %13065 = vmatprep.subr.mxu0 0.0
  %13066 = vmatpush2.msra.mxu0 0.0
  %13067 = vmatprep.mubr.f32.mxu0 0.0
  %v13068 = vand.u32 %v12535, 4294901760
  %13069 = vmatmul.mubr.f32.gmra.mxu0 %v13068
  %v13070 = vpop.f32.mrf.mxu0
  %v13071 = vadd.f32 %v12992, %v13070
  %v13072 = vpop.f32.mrf.mxu0
  %13073 = vdwg.mxu0
  %v13074 = vld [vmem:[%s12] sm:$0xff]
  %v13075 = vld [vmem:[%s12 + $0x8] sm:$0xff]
  %v13076 = vld [vmem:[%s12 + $0x10] sm:$0xff]
  %v13077 = vld [vmem:[%s12 + $0x18] sm:$0xff]
  %v13078 = vld [vmem:[%s12 + $0x20] sm:$0xff]
  %v13079 = vld [vmem:[%s12 + $0x28] sm:$0xff]
  %v13080 = vld [vmem:[%s12 + $0x30] sm:$0xff]
  %v13081 = vld [vmem:[%s12 + $0x38] sm:$0xff]
  %v13082 = vld [vmem:[%s12 + $0x40] sm:$0xff]
  %v13083 = vld [vmem:[%s12 + $0x48] sm:$0xff]
  %v13084 = vld [vmem:[%s12 + $0x50] sm:$0xff]
  %v13085 = vld [vmem:[%s12 + $0x58] sm:$0xff]
  %v13086 = vld [vmem:[%s13] sm:$0x1]
  %v13088 = vlaneseq
  %v13089 = vshrl.u32 %v13088, 7
  %v13090 = vsub.s32 0, %v13089
  %v13091 = vrot.slane %v13086, %v13090
  %v13094 = vsel %vm261, %v13071, 0
  %13096 = vmatprep.subr.mxu0 0.0
  %13097 = vmatpush1.msra.mxu0 0.0
  %13098 = vmatprep.subr.mxu0 0.0
  %13099 = vmatpush1.msra.mxu0 0.0
  %13100 = vmatprep.subr.mxu0 0.0
  %13101 = vmatpush1.msra.mxu0 0.0
  %13102 = vmatprep.subr.mxu0 0.0
  %13103 = vmatpush1.msra.mxu0 0.0
  %13104 = vmatprep.subr.mxu0 0.0
  %v13105 = vand.u32 %v13085, 4294901760
  %13106 = vmatpush1.msra.mxu0 %v13105
  %13107 = vmatprep.subr.mxu0 0.0
  %v13108 = vand.u32 %v13084, 4294901760
  %13109 = vmatpush1.msra.mxu0 %v13108
  %13110 = vmatprep.subr.mxu0 0.0
  %v13111 = vand.u32 %v13083, 4294901760
  %13112 = vmatpush1.msra.mxu0 %v13111
  %13113 = vmatprep.subr.mxu0 0.0
  %v13114 = vand.u32 %v13082, 4294901760
  %13115 = vmatpush1.msra.mxu0 %v13114
  %13116 = vmatprep.subr.mxu0 0.0
  %v13117 = vand.u32 %v13081, 4294901760
  %13118 = vmatpush1.msra.mxu0 %v13117
  %13119 = vmatprep.subr.mxu0 0.0
  %v13120 = vand.u32 %v13080, 4294901760
  %13121 = vmatpush1.msra.mxu0 %v13120
  %13122 = vmatprep.subr.mxu0 0.0
  %v13123 = vand.u32 %v13079, 4294901760
  %13124 = vmatpush1.msra.mxu0 %v13123
  %13125 = vmatprep.subr.mxu0 0.0
  %v13126 = vand.u32 %v13078, 4294901760
  %13127 = vmatpush1.msra.mxu0 %v13126
  %13128 = vmatprep.subr.mxu0 0.0
  %v13129 = vand.u32 %v13077, 4294901760
  %13130 = vmatpush1.msra.mxu0 %v13129
  %13131 = vmatprep.subr.mxu0 0.0
  %v13132 = vand.u32 %v13076, 4294901760
  %13133 = vmatpush1.msra.mxu0 %v13132
  %13134 = vmatprep.subr.mxu0 0.0
  %v13135 = vand.u32 %v13075, 4294901760
  %13136 = vmatpush1.msra.mxu0 %v13135
  %13137 = vmatprep.subr.mxu0 0.0
  %v13138 = vand.u32 %v13074, 4294901760
  %13139 = vmatpush1.msra.mxu0 %v13138
  %13140 = vmatprep.subr.mxu0 0.0
  %13141 = vmatpush2.msra.mxu0 0.0
  %13142 = vmatprep.subr.mxu0 0.0
  %13143 = vmatpush2.msra.mxu0 0.0
  %13144 = vmatprep.subr.mxu0 0.0
  %13145 = vmatpush2.msra.mxu0 0.0
  %13146 = vmatprep.subr.mxu0 0.0
  %13147 = vmatpush2.msra.mxu0 0.0
  %13148 = vmatprep.subr.mxu0 0.0
  %13149 = vmatpush2.msra.mxu0 0.0
  %13150 = vmatprep.subr.mxu0 0.0
  %13151 = vmatpush2.msra.mxu0 0.0
  %13152 = vmatprep.subr.mxu0 0.0
  %13153 = vmatpush2.msra.mxu0 0.0
  %13154 = vmatprep.subr.mxu0 0.0
  %13155 = vmatpush2.msra.mxu0 0.0
  %13156 = vmatprep.subr.mxu0 0.0
  %13157 = vmatpush2.msra.mxu0 0.0
  %13158 = vmatprep.subr.mxu0 0.0
  %13159 = vmatpush2.msra.mxu0 0.0
  %13160 = vmatprep.subr.mxu0 0.0
  %13161 = vmatpush2.msra.mxu0 0.0
  %13162 = vmatprep.subr.mxu0 0.0
  %13163 = vmatpush2.msra.mxu0 0.0
  %13164 = vmatprep.subr.mxu0 0.0
  %13165 = vmatpush2.msra.mxu0 0.0
  %13166 = vmatprep.subr.mxu0 0.0
  %13167 = vmatpush2.msra.mxu0 0.0
  %13168 = vmatprep.subr.mxu0 0.0
  %13169 = vmatpush2.msra.mxu0 0.0
  %13170 = vmatprep.subr.mxu0 0.0
  %13171 = vmatpush2.msra.mxu0 0.0
  %13172 = vmatprep.mubr.f32.mxu0 0.0
  %v13173 = vand.u32 %v13094, 4294901760
  %v13174 = vsub.f32 %v13094, %v13173
  %v13175 = vand.u32 %v13174, 4294901760
  %v13176 = vsub.f32 %v13174, %v13175
  %v13177 = vand.u32 %v13176, 4294901760
  %13178 = vmatmul.mubr.f32.gmra.mxu0 %v13177
  %v13179 = vpop.f32.mrf.mxu0
  %v13180 = vadd.f32 %v13091, %v13179
  %v13181 = vpop.f32.mrf.mxu0
  %13182 = vdwg.mxu0
  %13183 = vmatprep.subr.mxu0 0.0
  %13184 = vmatpush1.msra.mxu0 0.0
  %13185 = vmatprep.subr.mxu0 0.0
  %13186 = vmatpush1.msra.mxu0 0.0
  %13187 = vmatprep.subr.mxu0 0.0
  %13188 = vmatpush1.msra.mxu0 0.0
  %13189 = vmatprep.subr.mxu0 0.0
  %13190 = vmatpush1.msra.mxu0 0.0
  %13191 = vmatprep.subr.mxu0 0.0
  %v13192 = vand.u32 %v13085, 4294901760
  %v13193 = vsub.f32 %v13085, %v13192
  %v13194 = vand.u32 %v13193, 4294901760
  %v13195 = vsub.f32 %v13193, %v13194
  %v13196 = vand.u32 %v13195, 4294901760
  %13197 = vmatpush1.msra.mxu0 %v13196
  %13198 = vmatprep.subr.mxu0 0.0
  %v13199 = vand.u32 %v13084, 4294901760
  %v13200 = vsub.f32 %v13084, %v13199
  %v13201 = vand.u32 %v13200, 4294901760
  %v13202 = vsub.f32 %v13200, %v13201
  %v13203 = vand.u32 %v13202, 4294901760
  %13204 = vmatpush1.msra.mxu0 %v13203
  %13205 = vmatprep.subr.mxu0 0.0
  %v13206 = vand.u32 %v13083, 4294901760
  %v13207 = vsub.f32 %v13083, %v13206
  %v13208 = vand.u32 %v13207, 4294901760
  %v13209 = vsub.f32 %v13207, %v13208
  %v13210 = vand.u32 %v13209, 4294901760
  %13211 = vmatpush1.msra.mxu0 %v13210
  %13212 = vmatprep.subr.mxu0 0.0
  %v13213 = vand.u32 %v13082, 4294901760
  %v13214 = vsub.f32 %v13082, %v13213
  %v13215 = vand.u32 %v13214, 4294901760
  %v13216 = vsub.f32 %v13214, %v13215
  %v13217 = vand.u32 %v13216, 4294901760
  %13218 = vmatpush1.msra.mxu0 %v13217
  %13219 = vmatprep.subr.mxu0 0.0
  %v13220 = vand.u32 %v13081, 4294901760
  %v13221 = vsub.f32 %v13081, %v13220
  %v13222 = vand.u32 %v13221, 4294901760
  %v13223 = vsub.f32 %v13221, %v13222
  %v13224 = vand.u32 %v13223, 4294901760
  %13225 = vmatpush1.msra.mxu0 %v13224
  %13226 = vmatprep.subr.mxu0 0.0
  %v13227 = vand.u32 %v13080, 4294901760
  %v13228 = vsub.f32 %v13080, %v13227
  %v13229 = vand.u32 %v13228, 4294901760
  %v13230 = vsub.f32 %v13228, %v13229
  %v13231 = vand.u32 %v13230, 4294901760
  %13232 = vmatpush1.msra.mxu0 %v13231
  %13233 = vmatprep.subr.mxu0 0.0
  %v13234 = vand.u32 %v13079, 4294901760
  %v13235 = vsub.f32 %v13079, %v13234
  %v13236 = vand.u32 %v13235, 4294901760
  %v13237 = vsub.f32 %v13235, %v13236
  %v13238 = vand.u32 %v13237, 4294901760
  %13239 = vmatpush1.msra.mxu0 %v13238
  %13240 = vmatprep.subr.mxu0 0.0
  %v13241 = vand.u32 %v13078, 4294901760
  %v13242 = vsub.f32 %v13078, %v13241
  %v13243 = vand.u32 %v13242, 4294901760
  %v13244 = vsub.f32 %v13242, %v13243
  %v13245 = vand.u32 %v13244, 4294901760
  %13246 = vmatpush1.msra.mxu0 %v13245
  %13247 = vmatprep.subr.mxu0 0.0
  %v13248 = vand.u32 %v13077, 4294901760
  %v13249 = vsub.f32 %v13077, %v13248
  %v13250 = vand.u32 %v13249, 4294901760
  %v13251 = vsub.f32 %v13249, %v13250
  %v13252 = vand.u32 %v13251, 4294901760
  %13253 = vmatpush1.msra.mxu0 %v13252
  %13254 = vmatprep.subr.mxu0 0.0
  %v13255 = vand.u32 %v13076, 4294901760
  %v13256 = vsub.f32 %v13076, %v13255
  %v13257 = vand.u32 %v13256, 4294901760
  %v13258 = vsub.f32 %v13256, %v13257
  %v13259 = vand.u32 %v13258, 4294901760
  %13260 = vmatpush1.msra.mxu0 %v13259
  %13261 = vmatprep.subr.mxu0 0.0
  %v13262 = vand.u32 %v13075, 4294901760
  %v13263 = vsub.f32 %v13075, %v13262
  %v13264 = vand.u32 %v13263, 4294901760
  %v13265 = vsub.f32 %v13263, %v13264
  %v13266 = vand.u32 %v13265, 4294901760
  %13267 = vmatpush1.msra.mxu0 %v13266
  %13268 = vmatprep.subr.mxu0 0.0
  %v13269 = vand.u32 %v13074, 4294901760
  %v13270 = vsub.f32 %v13074, %v13269
  %v13271 = vand.u32 %v13270, 4294901760
  %v13272 = vsub.f32 %v13270, %v13271
  %v13273 = vand.u32 %v13272, 4294901760
  %13274 = vmatpush1.msra.mxu0 %v13273
  %13275 = vmatprep.subr.mxu0 0.0
  %13276 = vmatpush2.msra.mxu0 0.0
  %13277 = vmatprep.subr.mxu0 0.0
  %13278 = vmatpush2.msra.mxu0 0.0
  %13279 = vmatprep.subr.mxu0 0.0
  %13280 = vmatpush2.msra.mxu0 0.0
  %13281 = vmatprep.subr.mxu0 0.0
  %13282 = vmatpush2.msra.mxu0 0.0
  %13283 = vmatprep.subr.mxu0 0.0
  %13284 = vmatpush2.msra.mxu0 0.0
  %13285 = vmatprep.subr.mxu0 0.0
  %13286 = vmatpush2.msra.mxu0 0.0
  %13287 = vmatprep.subr.mxu0 0.0
  %13288 = vmatpush2.msra.mxu0 0.0
  %13289 = vmatprep.subr.mxu0 0.0
  %13290 = vmatpush2.msra.mxu0 0.0
  %13291 = vmatprep.subr.mxu0 0.0
  %13292 = vmatpush2.msra.mxu0 0.0
  %13293 = vmatprep.subr.mxu0 0.0
  %13294 = vmatpush2.msra.mxu0 0.0
  %13295 = vmatprep.subr.mxu0 0.0
  %13296 = vmatpush2.msra.mxu0 0.0
  %13297 = vmatprep.subr.mxu0 0.0
  %13298 = vmatpush2.msra.mxu0 0.0
  %13299 = vmatprep.subr.mxu0 0.0
  %13300 = vmatpush2.msra.mxu0 0.0
  %13301 = vmatprep.subr.mxu0 0.0
  %13302 = vmatpush2.msra.mxu0 0.0
  %13303 = vmatprep.subr.mxu0 0.0
  %13304 = vmatpush2.msra.mxu0 0.0
  %13305 = vmatprep.subr.mxu0 0.0
  %13306 = vmatpush2.msra.mxu0 0.0
  %13307 = vmatprep.mubr.f32.mxu0 0.0
  %v13308 = vand.u32 %v13094, 4294901760
  %13309 = vmatmul.mubr.f32.gmra.mxu0 %v13308
  %v13310 = vpop.f32.mrf.mxu0
  %v13311 = vadd.f32 %v13180, %v13310
  %v13312 = vpop.f32.mrf.mxu0
  %13313 = vdwg.mxu0
  %13314 = vmatprep.subr.mxu0 0.0
  %13315 = vmatpush1.msra.mxu0 0.0
  %13316 = vmatprep.subr.mxu0 0.0
  %13317 = vmatpush1.msra.mxu0 0.0
  %13318 = vmatprep.subr.mxu0 0.0
  %13319 = vmatpush1.msra.mxu0 0.0
  %13320 = vmatprep.subr.mxu0 0.0
  %13321 = vmatpush1.msra.mxu0 0.0
  %13322 = vmatprep.subr.mxu0 0.0
  %v13323 = vand.u32 %v13085, 4294901760
  %v13324 = vsub.f32 %v13085, %v13323
  %13325 = vmatpush1.msra.mxu0 %v13324
  %13326 = vmatprep.subr.mxu0 0.0
  %v13327 = vand.u32 %v13084, 4294901760
  %v13328 = vsub.f32 %v13084, %v13327
  %13329 = vmatpush1.msra.mxu0 %v13328
  %13330 = vmatprep.subr.mxu0 0.0
  %v13331 = vand.u32 %v13083, 4294901760
  %v13332 = vsub.f32 %v13083, %v13331
  %13333 = vmatpush1.msra.mxu0 %v13332
  %13334 = vmatprep.subr.mxu0 0.0
  %v13335 = vand.u32 %v13082, 4294901760
  %v13336 = vsub.f32 %v13082, %v13335
  %13337 = vmatpush1.msra.mxu0 %v13336
  %13338 = vmatprep.subr.mxu0 0.0
  %v13339 = vand.u32 %v13081, 4294901760
  %v13340 = vsub.f32 %v13081, %v13339
  %13341 = vmatpush1.msra.mxu0 %v13340
  %13342 = vmatprep.subr.mxu0 0.0
  %v13343 = vand.u32 %v13080, 4294901760
  %v13344 = vsub.f32 %v13080, %v13343
  %13345 = vmatpush1.msra.mxu0 %v13344
  %13346 = vmatprep.subr.mxu0 0.0
  %v13347 = vand.u32 %v13079, 4294901760
  %v13348 = vsub.f32 %v13079, %v13347
  %13349 = vmatpush1.msra.mxu0 %v13348
  %13350 = vmatprep.subr.mxu0 0.0
  %v13351 = vand.u32 %v13078, 4294901760
  %v13352 = vsub.f32 %v13078, %v13351
  %13353 = vmatpush1.msra.mxu0 %v13352
  %13354 = vmatprep.subr.mxu0 0.0
  %v13355 = vand.u32 %v13077, 4294901760
  %v13356 = vsub.f32 %v13077, %v13355
  %13357 = vmatpush1.msra.mxu0 %v13356
  %13358 = vmatprep.subr.mxu0 0.0
  %v13359 = vand.u32 %v13076, 4294901760
  %v13360 = vsub.f32 %v13076, %v13359
  %13361 = vmatpush1.msra.mxu0 %v13360
  %13362 = vmatprep.subr.mxu0 0.0
  %v13363 = vand.u32 %v13075, 4294901760
  %v13364 = vsub.f32 %v13075, %v13363
  %13365 = vmatpush1.msra.mxu0 %v13364
  %13366 = vmatprep.subr.mxu0 0.0
  %v13367 = vand.u32 %v13074, 4294901760
  %v13368 = vsub.f32 %v13074, %v13367
  %13369 = vmatpush1.msra.mxu0 %v13368
  %13370 = vmatprep.subr.mxu0 0.0
  %13371 = vmatpush2.msra.mxu0 0.0
  %13372 = vmatprep.subr.mxu0 0.0
  %13373 = vmatpush2.msra.mxu0 0.0
  %13374 = vmatprep.subr.mxu0 0.0
  %13375 = vmatpush2.msra.mxu0 0.0
  %13376 = vmatprep.subr.mxu0 0.0
  %13377 = vmatpush2.msra.mxu0 0.0
  %13378 = vmatprep.subr.mxu0 0.0
  %13379 = vmatpush2.msra.mxu0 0.0
  %13380 = vmatprep.subr.mxu0 0.0
  %13381 = vmatpush2.msra.mxu0 0.0
  %13382 = vmatprep.subr.mxu0 0.0
  %13383 = vmatpush2.msra.mxu0 0.0
  %13384 = vmatprep.subr.mxu0 0.0
  %13385 = vmatpush2.msra.mxu0 0.0
  %13386 = vmatprep.subr.mxu0 0.0
  %13387 = vmatpush2.msra.mxu0 0.0
  %13388 = vmatprep.subr.mxu0 0.0
  %13389 = vmatpush2.msra.mxu0 0.0
  %13390 = vmatprep.subr.mxu0 0.0
  %13391 = vmatpush2.msra.mxu0 0.0
  %13392 = vmatprep.subr.mxu0 0.0
  %13393 = vmatpush2.msra.mxu0 0.0
  %13394 = vmatprep.subr.mxu0 0.0
  %13395 = vmatpush2.msra.mxu0 0.0
  %13396 = vmatprep.subr.mxu0 0.0
  %13397 = vmatpush2.msra.mxu0 0.0
  %13398 = vmatprep.subr.mxu0 0.0
  %13399 = vmatpush2.msra.mxu0 0.0
  %13400 = vmatprep.subr.mxu0 0.0
  %13401 = vmatpush2.msra.mxu0 0.0
  %13402 = vmatprep.mubr.f32.mxu0 0.0
  %v13403 = vand.u32 %v13094, 4294901760
  %v13404 = vsub.f32 %v13094, %v13403
  %13405 = vmatmul.mubr.f32.gmra.mxu0 %v13404
  %v13406 = vpop.f32.mrf.mxu0
  %v13407 = vadd.f32 %v13311, %v13406
  %v13408 = vpop.f32.mrf.mxu0
  %13409 = vdwg.mxu0
  %13410 = vmatprep.subr.mxu0 0.0
  %13411 = vmatpush1.msra.mxu0 0.0
  %13412 = vmatprep.subr.mxu0 0.0
  %13413 = vmatpush1.msra.mxu0 0.0
  %13414 = vmatprep.subr.mxu0 0.0
  %13415 = vmatpush1.msra.mxu0 0.0
  %13416 = vmatprep.subr.mxu0 0.0
  %13417 = vmatpush1.msra.mxu0 0.0
  %13418 = vmatprep.subr.mxu0 0.0
  %v13419 = vand.u32 %v13085, 4294901760
  %13420 = vmatpush1.msra.mxu0 %v13419
  %13421 = vmatprep.subr.mxu0 0.0
  %v13422 = vand.u32 %v13084, 4294901760
  %13423 = vmatpush1.msra.mxu0 %v13422
  %13424 = vmatprep.subr.mxu0 0.0
  %v13425 = vand.u32 %v13083, 4294901760
  %13426 = vmatpush1.msra.mxu0 %v13425
  %13427 = vmatprep.subr.mxu0 0.0
  %v13428 = vand.u32 %v13082, 4294901760
  %13429 = vmatpush1.msra.mxu0 %v13428
  %13430 = vmatprep.subr.mxu0 0.0
  %v13431 = vand.u32 %v13081, 4294901760
  %13432 = vmatpush1.msra.mxu0 %v13431
  %13433 = vmatprep.subr.mxu0 0.0
  %v13434 = vand.u32 %v13080, 4294901760
  %13435 = vmatpush1.msra.mxu0 %v13434
  %13436 = vmatprep.subr.mxu0 0.0
  %v13437 = vand.u32 %v13079, 4294901760
  %13438 = vmatpush1.msra.mxu0 %v13437
  %13439 = vmatprep.subr.mxu0 0.0
  %v13440 = vand.u32 %v13078, 4294901760
  %13441 = vmatpush1.msra.mxu0 %v13440
  %13442 = vmatprep.subr.mxu0 0.0
  %v13443 = vand.u32 %v13077, 4294901760
  %13444 = vmatpush1.msra.mxu0 %v13443
  %13445 = vmatprep.subr.mxu0 0.0
  %v13446 = vand.u32 %v13076, 4294901760
  %13447 = vmatpush1.msra.mxu0 %v13446
  %13448 = vmatprep.subr.mxu0 0.0
  %v13449 = vand.u32 %v13075, 4294901760
  %13450 = vmatpush1.msra.mxu0 %v13449
  %13451 = vmatprep.subr.mxu0 0.0
  %v13452 = vand.u32 %v13074, 4294901760
  %13453 = vmatpush1.msra.mxu0 %v13452
  %13454 = vmatprep.subr.mxu0 0.0
  %13455 = vmatpush2.msra.mxu0 0.0
  %13456 = vmatprep.subr.mxu0 0.0
  %13457 = vmatpush2.msra.mxu0 0.0
  %13458 = vmatprep.subr.mxu0 0.0
  %13459 = vmatpush2.msra.mxu0 0.0
  %13460 = vmatprep.subr.mxu0 0.0
  %13461 = vmatpush2.msra.mxu0 0.0
  %13462 = vmatprep.subr.mxu0 0.0
  %13463 = vmatpush2.msra.mxu0 0.0
  %13464 = vmatprep.subr.mxu0 0.0
  %13465 = vmatpush2.msra.mxu0 0.0
  %13466 = vmatprep.subr.mxu0 0.0
  %13467 = vmatpush2.msra.mxu0 0.0
  %13468 = vmatprep.subr.mxu0 0.0
  %13469 = vmatpush2.msra.mxu0 0.0
  %13470 = vmatprep.subr.mxu0 0.0
  %13471 = vmatpush2.msra.mxu0 0.0
  %13472 = vmatprep.subr.mxu0 0.0
  %13473 = vmatpush2.msra.mxu0 0.0
  %13474 = vmatprep.subr.mxu0 0.0
  %13475 = vmatpush2.msra.mxu0 0.0
  %13476 = vmatprep.subr.mxu0 0.0
  %13477 = vmatpush2.msra.mxu0 0.0
  %13478 = vmatprep.subr.mxu0 0.0
  %13479 = vmatpush2.msra.mxu0 0.0
  %13480 = vmatprep.subr.mxu0 0.0
  %13481 = vmatpush2.msra.mxu0 0.0
  %13482 = vmatprep.subr.mxu0 0.0
  %13483 = vmatpush2.msra.mxu0 0.0
  %13484 = vmatprep.subr.mxu0 0.0
  %13485 = vmatpush2.msra.mxu0 0.0
  %13486 = vmatprep.mubr.f32.mxu0 0.0
  %v13487 = vand.u32 %v13094, 4294901760
  %v13488 = vsub.f32 %v13094, %v13487
  %v13489 = vand.u32 %v13488, 4294901760
  %13490 = vmatmul.mubr.f32.gmra.mxu0 %v13489
  %v13491 = vpop.f32.mrf.mxu0
  %v13492 = vadd.f32 %v13407, %v13491
  %v13493 = vpop.f32.mrf.mxu0
  %13494 = vdwg.mxu0
  %13495 = vmatprep.subr.mxu0 0.0
  %13496 = vmatpush1.msra.mxu0 0.0
  %13497 = vmatprep.subr.mxu0 0.0
  %13498 = vmatpush1.msra.mxu0 0.0
  %13499 = vmatprep.subr.mxu0 0.0
  %13500 = vmatpush1.msra.mxu0 0.0
  %13501 = vmatprep.subr.mxu0 0.0
  %13502 = vmatpush1.msra.mxu0 0.0
  %13503 = vmatprep.subr.mxu0 0.0
  %v13504 = vand.u32 %v13085, 4294901760
  %v13505 = vsub.f32 %v13085, %v13504
  %v13506 = vand.u32 %v13505, 4294901760
  %13507 = vmatpush1.msra.mxu0 %v13506
  %13508 = vmatprep.subr.mxu0 0.0
  %v13509 = vand.u32 %v13084, 4294901760
  %v13510 = vsub.f32 %v13084, %v13509
  %v13511 = vand.u32 %v13510, 4294901760
  %13512 = vmatpush1.msra.mxu0 %v13511
  %13513 = vmatprep.subr.mxu0 0.0
  %v13514 = vand.u32 %v13083, 4294901760
  %v13515 = vsub.f32 %v13083, %v13514
  %v13516 = vand.u32 %v13515, 4294901760
  %13517 = vmatpush1.msra.mxu0 %v13516
  %13518 = vmatprep.subr.mxu0 0.0
  %v13519 = vand.u32 %v13082, 4294901760
  %v13520 = vsub.f32 %v13082, %v13519
  %v13521 = vand.u32 %v13520, 4294901760
  %13522 = vmatpush1.msra.mxu0 %v13521
  %13523 = vmatprep.subr.mxu0 0.0
  %v13524 = vand.u32 %v13081, 4294901760
  %v13525 = vsub.f32 %v13081, %v13524
  %v13526 = vand.u32 %v13525, 4294901760
  %13527 = vmatpush1.msra.mxu0 %v13526
  %13528 = vmatprep.subr.mxu0 0.0
  %v13529 = vand.u32 %v13080, 4294901760
  %v13530 = vsub.f32 %v13080, %v13529
  %v13531 = vand.u32 %v13530, 4294901760
  %13532 = vmatpush1.msra.mxu0 %v13531
  %13533 = vmatprep.subr.mxu0 0.0
  %v13534 = vand.u32 %v13079, 4294901760
  %v13535 = vsub.f32 %v13079, %v13534
  %v13536 = vand.u32 %v13535, 4294901760
  %13537 = vmatpush1.msra.mxu0 %v13536
  %13538 = vmatprep.subr.mxu0 0.0
  %v13539 = vand.u32 %v13078, 4294901760
  %v13540 = vsub.f32 %v13078, %v13539
  %v13541 = vand.u32 %v13540, 4294901760
  %13542 = vmatpush1.msra.mxu0 %v13541
  %13543 = vmatprep.subr.mxu0 0.0
  %v13544 = vand.u32 %v13077, 4294901760
  %v13545 = vsub.f32 %v13077, %v13544
  %v13546 = vand.u32 %v13545, 4294901760
  %13547 = vmatpush1.msra.mxu0 %v13546
  %13548 = vmatprep.subr.mxu0 0.0
  %v13549 = vand.u32 %v13076, 4294901760
  %v13550 = vsub.f32 %v13076, %v13549
  %v13551 = vand.u32 %v13550, 4294901760
  %13552 = vmatpush1.msra.mxu0 %v13551
  %13553 = vmatprep.subr.mxu0 0.0
  %v13554 = vand.u32 %v13075, 4294901760
  %v13555 = vsub.f32 %v13075, %v13554
  %v13556 = vand.u32 %v13555, 4294901760
  %13557 = vmatpush1.msra.mxu0 %v13556
  %13558 = vmatprep.subr.mxu0 0.0
  %v13559 = vand.u32 %v13074, 4294901760
  %v13560 = vsub.f32 %v13074, %v13559
  %v13561 = vand.u32 %v13560, 4294901760
  %13562 = vmatpush1.msra.mxu0 %v13561
  %13563 = vmatprep.subr.mxu0 0.0
  %13564 = vmatpush2.msra.mxu0 0.0
  %13565 = vmatprep.subr.mxu0 0.0
  %13566 = vmatpush2.msra.mxu0 0.0
  %13567 = vmatprep.subr.mxu0 0.0
  %13568 = vmatpush2.msra.mxu0 0.0
  %13569 = vmatprep.subr.mxu0 0.0
  %13570 = vmatpush2.msra.mxu0 0.0
  %13571 = vmatprep.subr.mxu0 0.0
  %13572 = vmatpush2.msra.mxu0 0.0
  %13573 = vmatprep.subr.mxu0 0.0
  %13574 = vmatpush2.msra.mxu0 0.0
  %13575 = vmatprep.subr.mxu0 0.0
  %13576 = vmatpush2.msra.mxu0 0.0
  %13577 = vmatprep.subr.mxu0 0.0
  %13578 = vmatpush2.msra.mxu0 0.0
  %13579 = vmatprep.subr.mxu0 0.0
  %13580 = vmatpush2.msra.mxu0 0.0
  %13581 = vmatprep.subr.mxu0 0.0
  %13582 = vmatpush2.msra.mxu0 0.0
  %13583 = vmatprep.subr.mxu0 0.0
  %13584 = vmatpush2.msra.mxu0 0.0
  %13585 = vmatprep.subr.mxu0 0.0
  %13586 = vmatpush2.msra.mxu0 0.0
  %13587 = vmatprep.subr.mxu0 0.0
  %13588 = vmatpush2.msra.mxu0 0.0
  %13589 = vmatprep.subr.mxu0 0.0
  %13590 = vmatpush2.msra.mxu0 0.0
  %13591 = vmatprep.subr.mxu0 0.0
  %13592 = vmatpush2.msra.mxu0 0.0
  %13593 = vmatprep.subr.mxu0 0.0
  %13594 = vmatpush2.msra.mxu0 0.0
  %13595 = vmatprep.mubr.f32.mxu0 0.0
  %v13596 = vand.u32 %v13094, 4294901760
  %13597 = vmatmul.mubr.f32.gmra.mxu0 %v13596
  %v13598 = vpop.f32.mrf.mxu0
  %v13599 = vadd.f32 %v13492, %v13598
  %v13600 = vpop.f32.mrf.mxu0
  %13601 = vdwg.mxu0
  %13602 = vmatprep.subr.mxu0 0.0
  %13603 = vmatpush1.msra.mxu0 0.0
  %13604 = vmatprep.subr.mxu0 0.0
  %13605 = vmatpush1.msra.mxu0 0.0
  %13606 = vmatprep.subr.mxu0 0.0
  %13607 = vmatpush1.msra.mxu0 0.0
  %13608 = vmatprep.subr.mxu0 0.0
  %13609 = vmatpush1.msra.mxu0 0.0
  %13610 = vmatprep.subr.mxu0 0.0
  %v13611 = vand.u32 %v13085, 4294901760
  %13612 = vmatpush1.msra.mxu0 %v13611
  %13613 = vmatprep.subr.mxu0 0.0
  %v13614 = vand.u32 %v13084, 4294901760
  %13615 = vmatpush1.msra.mxu0 %v13614
  %13616 = vmatprep.subr.mxu0 0.0
  %v13617 = vand.u32 %v13083, 4294901760
  %13618 = vmatpush1.msra.mxu0 %v13617
  %13619 = vmatprep.subr.mxu0 0.0
  %v13620 = vand.u32 %v13082, 4294901760
  %13621 = vmatpush1.msra.mxu0 %v13620
  %13622 = vmatprep.subr.mxu0 0.0
  %v13623 = vand.u32 %v13081, 4294901760
  %13624 = vmatpush1.msra.mxu0 %v13623
  %13625 = vmatprep.subr.mxu0 0.0
  %v13626 = vand.u32 %v13080, 4294901760
  %13627 = vmatpush1.msra.mxu0 %v13626
  %13628 = vmatprep.subr.mxu0 0.0
  %v13629 = vand.u32 %v13079, 4294901760
  %13630 = vmatpush1.msra.mxu0 %v13629
  %13631 = vmatprep.subr.mxu0 0.0
  %v13632 = vand.u32 %v13078, 4294901760
  %13633 = vmatpush1.msra.mxu0 %v13632
  %13634 = vmatprep.subr.mxu0 0.0
  %v13635 = vand.u32 %v13077, 4294901760
  %13636 = vmatpush1.msra.mxu0 %v13635
  %13637 = vmatprep.subr.mxu0 0.0
  %v13638 = vand.u32 %v13076, 4294901760
  %13639 = vmatpush1.msra.mxu0 %v13638
  %13640 = vmatprep.subr.mxu0 0.0
  %v13641 = vand.u32 %v13075, 4294901760
  %13642 = vmatpush1.msra.mxu0 %v13641
  %13643 = vmatprep.subr.mxu0 0.0
  %v13644 = vand.u32 %v13074, 4294901760
  %13645 = vmatpush1.msra.mxu0 %v13644
  %13646 = vmatprep.subr.mxu0 0.0
  %13647 = vmatpush2.msra.mxu0 0.0
  %13648 = vmatprep.subr.mxu0 0.0
  %13649 = vmatpush2.msra.mxu0 0.0
  %13650 = vmatprep.subr.mxu0 0.0
  %13651 = vmatpush2.msra.mxu0 0.0
  %13652 = vmatprep.subr.mxu0 0.0
  %13653 = vmatpush2.msra.mxu0 0.0
  %13654 = vmatprep.subr.mxu0 0.0
  %13655 = vmatpush2.msra.mxu0 0.0
  %13656 = vmatprep.subr.mxu0 0.0
  %13657 = vmatpush2.msra.mxu0 0.0
  %13658 = vmatprep.subr.mxu0 0.0
  %13659 = vmatpush2.msra.mxu0 0.0
  %13660 = vmatprep.subr.mxu0 0.0
  %13661 = vmatpush2.msra.mxu0 0.0
  %13662 = vmatprep.subr.mxu0 0.0
  %13663 = vmatpush2.msra.mxu0 0.0
  %13664 = vmatprep.subr.mxu0 0.0
  %13665 = vmatpush2.msra.mxu0 0.0
  %13666 = vmatprep.subr.mxu0 0.0
  %13667 = vmatpush2.msra.mxu0 0.0
  %13668 = vmatprep.subr.mxu0 0.0
  %13669 = vmatpush2.msra.mxu0 0.0
  %13670 = vmatprep.subr.mxu0 0.0
  %13671 = vmatpush2.msra.mxu0 0.0
  %13672 = vmatprep.subr.mxu0 0.0
  %13673 = vmatpush2.msra.mxu0 0.0
  %13674 = vmatprep.subr.mxu0 0.0
  %13675 = vmatpush2.msra.mxu0 0.0
  %13676 = vmatprep.subr.mxu0 0.0
  %13677 = vmatpush2.msra.mxu0 0.0
  %13678 = vmatprep.mubr.f32.mxu0 0.0
  %v13679 = vand.u32 %v13094, 4294901760
  %13680 = vmatmul.mubr.f32.gmra.mxu0 %v13679
  %v13681 = vpop.f32.mrf.mxu0
  %v13682 = vadd.f32 %v13599, %v13681
  %v13683 = vpop.f32.mrf.mxu0
  %13684 = vdwg.mxu0
  %vm13685 = vcmask 80896
  %13686 = vst.msk [vmem:[%s14] sm:$0xff] %vm13685, %v13682
  // Predicated region
  $region58: #{cnn_model_forward.1} parent=0 // pred_check
    _
  $region59: #{cnn_model_forward.1} parent=0 // pred_check_branch
    %13688 = sbr.rel (0) target = $region61
  $region60: #{cnn_model_forward.1} parent=0 // pred_region
    _
  $region61: #{cnn_model_forward.1} parent=0 // pred_fallthru
    _
  // Predicated region
  $region62: #{cnn_model_forward.1} parent=0 // pred_check
    _
  $region63: #{cnn_model_forward.1} parent=0 // pred_check_branch
    %13690 = sbr.rel (0) target = $region65
  $region64: #{cnn_model_forward.1} parent=0 // pred_region
    _
  $region65: #{cnn_model_forward.1} parent=0 // pred_fallthru
    _

</llo_original>
